<compile_context>
chip_gen: v6e
topology: v6e:2x2x1
jax: 0.10.0
libtpu: 0.0.40
codegen_flags: <defaults>
</compile_context>

<pallas_src>
import jax
import jax.numpy as jnp
from jax.experimental import pallas as pl
from jax.experimental.pallas import tpu as pltpu

EPS = 1e-5  # nn.InstanceNorm2d default eps, affine=False, biased variance


def residual_block_kernel(x_ref, w1_ref, w2_ref, o_ref, pad_ref):
    # x_ref   : (Nb, H, W, C)  f32 input tile (NHWC), also the residual
    # w1/w2   : (3, 3, C, C)   per-tap weights, (kh, kw, cin, cout), MXU dtype
    # o_ref   : (Nb, H, W, C)  f32 output tile
    # pad_ref : (Nb, H+2, W+2, C) VMEM scratch in the MXU dtype
    Nb, H, W, C = x_ref.shape
    cdt = pad_ref.dtype

    x = x_ref[...]                                           # f32 residual

    def fill_reflect_pad(t):
        # t: (Nb, H, W, C) in cdt. ReflectionPad2d(1): pad row -1 == row 1,
        # pad row H == row H-2 (same for columns). Corners follow from doing
        # rows first, then columns (corner (0,0) == original (1,1)).
        pad_ref[:, 1:H + 1, 1:W + 1, :] = t
        pad_ref[:, 0:1, 1:W + 1, :] = t[:, 1:2, :, :]
        pad_ref[:, H + 1:H + 2, 1:W + 1, :] = t[:, H - 2:H - 1, :, :]
        pad_ref[:, :, 0:1, :] = pad_ref[:, :, 2:3, :]
        pad_ref[:, :, W + 1:W + 2, :] = pad_ref[:, :, W - 1:W, :]

    def conv3x3(w_ref):
        # 9 accumulated per-tap matmuls, taps are windows of the pad scratch.
        acc = jnp.zeros((Nb * H * W, C), jnp.float32)
        for kh in range(3):
            for kw in range(3):
                tap = pad_ref[:, kh:kh + H, kw:kw + W, :]
                tap = tap.reshape(Nb * H * W, C)
                acc = acc + jnp.dot(tap, w_ref[kh, kw, :, :],
                                    preferred_element_type=jnp.float32)
        return acc.reshape(Nb, H * W, C)

    def instance_norm(y):
        # y: (Nb, H*W, C) f32; two-pass (centered) biased variance per
        # (image, channel) -- matches PyTorch InstanceNorm2d(affine=False).
        mean = jnp.mean(y, axis=1, keepdims=True)            # (Nb, 1, C)
        yc = y - mean
        var = jnp.mean(yc * yc, axis=1, keepdims=True)       # (Nb, 1, C)
        return yc * jax.lax.rsqrt(var + EPS)

    # conv1 -> instance norm -> relu     (bias dropped: cancelled by IN mean)
    fill_reflect_pad(x.astype(cdt))
    y = jnp.maximum(instance_norm(conv3x3(w1_ref)), 0.0)     # (Nb, H*W, C) f32

    # conv2 -> instance norm             (scratch is reused for the 2nd pad)
    fill_reflect_pad(y.astype(cdt).reshape(Nb, H, W, C))
    z = instance_norm(conv3x3(w2_ref))                       # (Nb, H*W, C) f32

    # residual add
    o_ref[...] = (x + z.reshape(Nb, H, W, C)).astype(o_ref.dtype)


def _chip_info():
    """(vmem_capacity_bytes, tensorcores_sharing_the_parallel_grid_axis)."""
    vmem_cap = 128 * 2**20
    try:
        vmem_cap = int(pltpu.get_tpu_info().vmem_capacity_bytes)
    except Exception:
        pass
    kind = ""
    try:
        kind = jax.devices()[0].device_kind.lower()
    except Exception:
        pass
    # v7x: 64 MiB VMEM per TC and 2 TCs/chip; v5e / v6e: 128 MiB, 1 TC.
    n_tc = 2 if ("v7" in kind or vmem_cap <= 96 * 2**20) else 1
    return vmem_cap, n_tc


def _vmem_footprint(nb, H, W, C, cdt_bytes, weight_bufs):
    # Rough per-grid-step VMEM footprint, including double-buffered x / o
    # blocks and the (possibly single-buffered) weight slabs.
    laneC = 128 * pl.cdiv(C, 128)
    hw = H * W
    blk = 4 * nb * hw * laneC                               # one f32 block
    io = 2 * 2 * blk                                        # x & o, 2 buffers
    pad = cdt_bytes * nb * (H + 2) * (W + 2) * laneC        # padded scratch
    interm = nb * hw * laneC * (2 * 4 + 2 * cdt_bytes)      # acc/y f32 + taps
    w = weight_bufs * 2 * cdt_bytes * 9 * C * laneC         # two weight slabs
    return io + pad + interm + w


def _pick_batch_block(N, H, W, C, cdt_bytes, vmem_cap, n_tc, weight_bufs):
    budget = int(0.6 * vmem_cap)
    divisors = [d for d in range(1, N + 1) if N % d == 0]
    fits = [d for d in divisors
            if _vmem_footprint(d, H, W, C, cdt_bytes, weight_bufs) <= budget]
    if not fits:
        fits = [1]
    if n_tc >= 2 and N >= 2:
        # keep >= 2 grid steps so both TensorCores get work; prefer an even
        # step count for balanced occupancy.
        multi = [d for d in fits if (N // d) >= 2]
        if multi:
            even = [d for d in multi if (N // d) % 2 == 0]
            return max(even) if even else max(multi)
    return max(fits)


def _weight_spec(shape):
    # Constant-index weight slab; single-buffer it when pipeline_mode exists.
    index_map = lambda n: (0,) * len(shape)
    try:
        spec = pl.BlockSpec(shape, index_map, pipeline_mode=pl.Buffered(1))
        return spec, 1
    except TypeError:
        return pl.BlockSpec(shape, index_map), 2


def residual_block(x_nchw, w1, b1, w2, b2, *, nb=None):
    """x_nchw: (N, C, H, W) f32; w1/w2: (C, C, 3, 3) OIHW; b1/b2: (C,).

    b1 / b2 are accepted for API parity but not used: each bias is
    immediately followed by InstanceNorm2d(affine=False), whose per-channel
    mean subtraction cancels it exactly.
    """
    del b1, b2
    N, C, H, W = x_nchw.shape
    assert H >= 2 and W >= 2, "ReflectionPad2d(1) needs H, W >= 2"

    x = jnp.transpose(x_nchw, (0, 2, 3, 1)).astype(jnp.float32)   # NHWC

    # MXU dtype: bf16 for real channel counts, f32 for tiny C.
    cdt = jnp.bfloat16 if C >= 128 else jnp.float32
    cdt_bytes = 2 if cdt == jnp.bfloat16 else 4

    # OIHW -> (kh, kw, cin, cout) per-tap weight slabs.
    w1s = jnp.transpose(w1, (2, 3, 1, 0)).astype(cdt)             # (3,3,C,C)
    w2s = jnp.transpose(w2, (2, 3, 1, 0)).astype(cdt)

    w_spec1, weight_bufs = _weight_spec((3, 3, C, C))
    w_spec2, _ = _weight_spec((3, 3, C, C))

    vmem_cap, n_tc = _chip_info()
    if nb is None:
        nb = _pick_batch_block(N, H, W, C, cdt_bytes, vmem_cap, n_tc,
                               weight_bufs)
    assert N % nb == 0, "nb must divide N"
    grid = (N // nb,)

    footprint = _vmem_footprint(nb, H, W, C, cdt_bytes, weight_bufs)
    vmem_limit = int(min(int(0.9 * vmem_cap),
                         max(32 * 2**20, int(1.3 * footprint))))

    cost = pl.CostEstimate(
        flops=2 * 2 * (N * H * W) * (9 * C) * C,
        transcendentals=2 * N * C,
        bytes_accessed=2 * 4 * N * H * W * C + 2 * 9 * C * C * cdt_bytes,
    )

    out_nhwc = pl.pallas_call(
        residual_block_kernel,
        out_shape=jax.ShapeDtypeStruct((N, H, W, C), jnp.float32),
        grid_spec=pltpu.PrefetchScalarGridSpec(
            num_scalar_prefetch=0,
            grid=grid,
            in_specs=[
                pl.BlockSpec((nb, H, W, C), lambda n: (n, 0, 0, 0)),  # x
                w_spec1,                                              # w1 taps
                w_spec2,                                              # w2 taps
            ],
            out_specs=pl.BlockSpec((nb, H, W, C), lambda n: (n, 0, 0, 0)),
            scratch_shapes=[pltpu.VMEM((nb, H + 2, W + 2, C), cdt)],
        ),
        compiler_params=pltpu.CompilerParams(
            dimension_semantics=("parallel",),
            vmem_limit_bytes=vmem_limit,
        ),
        cost_estimate=cost,
    )(x, w1s, w2s)

    return jnp.transpose(out_nhwc, (0, 3, 1, 2))


def ref_forward(x_nchw, w1, b1, w2, b2):
    # pure-JAX reference (same semantics as the PyTorch module, bias included)
    x = jnp.transpose(x_nchw, (0, 2, 3, 1)).astype(jnp.float32)
    N, H, W, C = x.shape

    def conv(xp, w, b):
        k = jnp.transpose(w, (2, 3, 1, 0))                 # OIHW -> HWIO
        y = jax.lax.conv_general_dilated(
            xp, k, (1, 1), "VALID",
            dimension_numbers=("NHWC", "HWIO", "NHWC"))
        return y + b.reshape(1, 1, 1, C)

    def inorm(y):
        m = jnp.mean(y, axis=(1, 2), keepdims=True)
        v = jnp.mean((y - m) ** 2, axis=(1, 2), keepdims=True)
        return (y - m) / jnp.sqrt(v + EPS)

    h = conv(jnp.pad(x, ((0, 0), (1, 1), (1, 1), (0, 0)), "reflect"), w1, b1)
    h = jnp.maximum(inorm(h), 0.0)
    h = conv(jnp.pad(h, ((0, 0), (1, 1), (1, 1), (0, 0)), "reflect"), w2, b2)
    h = inorm(h)
    return jnp.transpose(x + h, (0, 3, 1, 2))


if __name__ == "__main__":
    key = jax.random.PRNGKey(0)
    N, C, H, W = 2, 4, 16, 16
    k1, k2, k3, k4, k5 = jax.random.split(key, 5)

    x = jax.random.normal(k1, (N, C, H, W), jnp.float32)

    # Conv2d(C, C, 3) parameters in PyTorch OIHW layout
    fan_in = C * 3 * 3
    bound = 1.0 / (fan_in ** 0.5)
    w1 = jax.random.uniform(k2, (C, C, 3, 3), jnp.float32, -bound, bound)
    b1 = jax.random.uniform(k3, (C,), jnp.float32, -bound, bound)
    w2 = jax.random.uniform(k4, (C, C, 3, 3), jnp.float32, -bound, bound)
    b2 = jax.random.uniform(k5, (C,), jnp.float32, -bound, bound)

    out = jax.block_until_ready(residual_block(x, w1, b1, w2, b2))

    ref = ref_forward(x, w1, b1, w2, b2)
    assert out.shape == (N, C, H, W)
    max_err = float(jnp.max(jnp.abs(out - ref)))
    assert jnp.allclose(out, ref, atol=1e-3, rtol=1e-3), max_err

    print("KERNEL_OK")
</pallas_src>

<mosaic_0001>
module attributes {stable_mosaic.version = 11 : i64} {
  func.func @residual_block_kernel(%arg0: i32, %arg1: memref<2x16x16x4xf32, #tpu.memory_space<vmem>>, %arg2: memref<3x3x4x4xf32, #tpu.memory_space<vmem>>, %arg3: memref<3x3x4x4xf32, #tpu.memory_space<vmem>>, %arg4: memref<2x16x16x4xf32, #tpu.memory_space<vmem>>, %arg5: memref<2x18x18x4xf32, #tpu.memory_space<vmem>>) attributes {dimension_semantics = [#tpu.dimension_semantics<parallel>], iteration_bounds = array<i64: 1>, scalar_prefetch = 0 : i64, scratch_operands = 1 : i64, tpu.core_type = #tpu.core_type<tc>, window_params = [{transform_indices = @transform_0, window_bounds = array<i64: 2, 16, 16, 4>}, {pipeline_mode = #tpu.pipeline_mode<synchronous>, transform_indices = @transform_1, window_bounds = array<i64: 3, 3, 4, 4>}, {pipeline_mode = #tpu.pipeline_mode<synchronous>, transform_indices = @transform_2, window_bounds = array<i64: 3, 3, 4, 4>}, {transform_indices = @transform_3, window_bounds = array<i64: 2, 16, 16, 4>}]} {
    %c0 = arith.constant 0 : index
    %c0_0 = arith.constant 0 : index
    %c0_1 = arith.constant 0 : index
    %c0_2 = arith.constant 0 : index
    %0 = vector.load %arg1[%c0, %c0_0, %c0_1, %c0_2] : memref<2x16x16x4xf32, #tpu.memory_space<vmem>>, vector<2x16x16x4xf32>
    %c0_3 = arith.constant 0 : index
    %c1 = arith.constant 1 : index
    %c1_4 = arith.constant 1 : index
    %c0_5 = arith.constant 0 : index
    %1 = vector.load %arg5[%c0_3, %c1, %c1_4, %c0_5] : memref<2x18x18x4xf32, #tpu.memory_space<vmem>>, vector<2x16x16x4xf32>
    tpu.vector_store %arg5[%c0_3, %c1, %c1_4, %c0_5], %0 {strides = array<i32>} : memref<2x18x18x4xf32, #tpu.memory_space<vmem>>, vector<2x16x16x4xf32>,
    %2 = vector.extract_strided_slice %0 {offsets = [0, 1, 0, 0], sizes = [2, 1, 16, 4], strides = [1, 1, 1, 1]} : vector<2x16x16x4xf32> to vector<2x1x16x4xf32>
    %c0_6 = arith.constant 0 : index
    %c0_7 = arith.constant 0 : index
    %c1_8 = arith.constant 1 : index
    %c0_9 = arith.constant 0 : index
    %3 = vector.load %arg5[%c0_6, %c0_7, %c1_8, %c0_9] : memref<2x18x18x4xf32, #tpu.memory_space<vmem>>, vector<2x1x16x4xf32>
    tpu.vector_store %arg5[%c0_6, %c0_7, %c1_8, %c0_9], %2 {strides = array<i32>} : memref<2x18x18x4xf32, #tpu.memory_space<vmem>>, vector<2x1x16x4xf32>,
    %4 = vector.extract_strided_slice %0 {offsets = [0, 14, 0, 0], sizes = [2, 1, 16, 4], strides = [1, 1, 1, 1]} : vector<2x16x16x4xf32> to vector<2x1x16x4xf32>
    %c0_10 = arith.constant 0 : index
    %c17 = arith.constant 17 : index
    %c1_11 = arith.constant 1 : index
    %c0_12 = arith.constant 0 : index
    %5 = vector.load %arg5[%c0_10, %c17, %c1_11, %c0_12] : memref<2x18x18x4xf32, #tpu.memory_space<vmem>>, vector<2x1x16x4xf32>
    tpu.vector_store %arg5[%c0_10, %c17, %c1_11, %c0_12], %4 {strides = array<i32>} : memref<2x18x18x4xf32, #tpu.memory_space<vmem>>, vector<2x1x16x4xf32>,
    %c0_13 = arith.constant 0 : index
    %c0_14 = arith.constant 0 : index
    %c2 = arith.constant 2 : index
    %c0_15 = arith.constant 0 : index
    %6 = vector.load %arg5[%c0_13, %c0_14, %c2, %c0_15] : memref<2x18x18x4xf32, #tpu.memory_space<vmem>>, vector<2x18x1x4xf32>
    %c0_16 = arith.constant 0 : index
    %c0_17 = arith.constant 0 : index
    %c0_18 = arith.constant 0 : index
    %c0_19 = arith.constant 0 : index
    %7 = vector.load %arg5[%c0_16, %c0_17, %c0_18, %c0_19] : memref<2x18x18x4xf32, #tpu.memory_space<vmem>>, vector<2x18x1x4xf32>
    tpu.vector_store %arg5[%c0_16, %c0_17, %c0_18, %c0_19], %6 {strides = array<i32>} : memref<2x18x18x4xf32, #tpu.memory_space<vmem>>, vector<2x18x1x4xf32>,
    %c0_20 = arith.constant 0 : index
    %c0_21 = arith.constant 0 : index
    %c15 = arith.constant 15 : index
    %c0_22 = arith.constant 0 : index
    %8 = vector.load %arg5[%c0_20, %c0_21, %c15, %c0_22] : memref<2x18x18x4xf32, #tpu.memory_space<vmem>>, vector<2x18x1x4xf32>
    %c0_23 = arith.constant 0 : index
    %c0_24 = arith.constant 0 : index
    %c17_25 = arith.constant 17 : index
    %c0_26 = arith.constant 0 : index
    %9 = vector.load %arg5[%c0_23, %c0_24, %c17_25, %c0_26] : memref<2x18x18x4xf32, #tpu.memory_space<vmem>>, vector<2x18x1x4xf32>
    tpu.vector_store %arg5[%c0_23, %c0_24, %c17_25, %c0_26], %8 {strides = array<i32>} : memref<2x18x18x4xf32, #tpu.memory_space<vmem>>, vector<2x18x1x4xf32>,
    %cst = arith.constant 0.000000e+00 : f32
    %10 = vector.broadcast %cst : f32 to vector<512x4xf32>
    %c0_27 = arith.constant 0 : index
    %c0_28 = arith.constant 0 : index
    %c0_29 = arith.constant 0 : index
    %c0_30 = arith.constant 0 : index
    %11 = vector.load %arg5[%c0_27, %c0_28, %c0_29, %c0_30] : memref<2x18x18x4xf32, #tpu.memory_space<vmem>>, vector<2x16x16x4xf32>
    %12 = vector.shape_cast %11 : vector<2x16x16x4xf32> to vector<512x4xf32>
    %c0_31 = arith.constant 0 : index
    %c0_32 = arith.constant 0 : index
    %c0_33 = arith.constant 0 : index
    %c0_34 = arith.constant 0 : index
    %13 = vector.load %arg2[%c0_31, %c0_32, %c0_33, %c0_34] : memref<3x3x4x4xf32, #tpu.memory_space<vmem>>, vector<1x1x4x4xf32>
    %14 = vector.shape_cast %13 : vector<1x1x4x4xf32> to vector<4x4xf32>
    %cst_35 = arith.constant dense<0.000000e+00> : vector<512x4xf32>
    %15 = tpu.matmul %12, %14, %cst_35 {dimension_numbers = #tpu.dot_dimension_numbers<[1], [0], [0], [1], [0, 0, 1, 1], [], []>} : vector<512x4xf32>, vector<4x4xf32>, vector<512x4xf32> -> vector<512x4xf32>
    %16 = arith.addf %10, %15 : vector<512x4xf32>
    %c0_36 = arith.constant 0 : index
    %c0_37 = arith.constant 0 : index
    %c1_38 = arith.constant 1 : index
    %c0_39 = arith.constant 0 : index
    %17 = vector.load %arg5[%c0_36, %c0_37, %c1_38, %c0_39] : memref<2x18x18x4xf32, #tpu.memory_space<vmem>>, vector<2x16x16x4xf32>
    %18 = vector.shape_cast %17 : vector<2x16x16x4xf32> to vector<512x4xf32>
    %c0_40 = arith.constant 0 : index
    %c1_41 = arith.constant 1 : index
    %c0_42 = arith.constant 0 : index
    %c0_43 = arith.constant 0 : index
    %19 = vector.load %arg2[%c0_40, %c1_41, %c0_42, %c0_43] : memref<3x3x4x4xf32, #tpu.memory_space<vmem>>, vector<1x1x4x4xf32>
    %20 = vector.shape_cast %19 : vector<1x1x4x4xf32> to vector<4x4xf32>
    %cst_44 = arith.constant dense<0.000000e+00> : vector<512x4xf32>
    %21 = tpu.matmul %18, %20, %cst_44 {dimension_numbers = #tpu.dot_dimension_numbers<[1], [0], [0], [1], [0, 0, 1, 1], [], []>} : vector<512x4xf32>, vector<4x4xf32>, vector<512x4xf32> -> vector<512x4xf32>
    %22 = arith.addf %16, %21 : vector<512x4xf32>
    %c0_45 = arith.constant 0 : index
    %c0_46 = arith.constant 0 : index
    %c2_47 = arith.constant 2 : index
    %c0_48 = arith.constant 0 : index
    %23 = vector.load %arg5[%c0_45, %c0_46, %c2_47, %c0_48] : memref<2x18x18x4xf32, #tpu.memory_space<vmem>>, vector<2x16x16x4xf32>
    %24 = vector.shape_cast %23 : vector<2x16x16x4xf32> to vector<512x4xf32>
    %c0_49 = arith.constant 0 : index
    %c2_50 = arith.constant 2 : index
    %c0_51 = arith.constant 0 : index
    %c0_52 = arith.constant 0 : index
    %25 = vector.load %arg2[%c0_49, %c2_50, %c0_51, %c0_52] : memref<3x3x4x4xf32, #tpu.memory_space<vmem>>, vector<1x1x4x4xf32>
    %26 = vector.shape_cast %25 : vector<1x1x4x4xf32> to vector<4x4xf32>
    %cst_53 = arith.constant dense<0.000000e+00> : vector<512x4xf32>
    %27 = tpu.matmul %24, %26, %cst_53 {dimension_numbers = #tpu.dot_dimension_numbers<[1], [0], [0], [1], [0, 0, 1, 1], [], []>} : vector<512x4xf32>, vector<4x4xf32>, vector<512x4xf32> -> vector<512x4xf32>
    %28 = arith.addf %22, %27 : vector<512x4xf32>
    %c0_54 = arith.constant 0 : index
    %c1_55 = arith.constant 1 : index
    %c0_56 = arith.constant 0 : index
    %c0_57 = arith.constant 0 : index
    %29 = vector.load %arg5[%c0_54, %c1_55, %c0_56, %c0_57] : memref<2x18x18x4xf32, #tpu.memory_space<vmem>>, vector<2x16x16x4xf32>
    %30 = vector.shape_cast %29 : vector<2x16x16x4xf32> to vector<512x4xf32>
    %c1_58 = arith.constant 1 : index
    %c0_59 = arith.constant 0 : index
    %c0_60 = arith.constant 0 : index
    %c0_61 = arith.constant 0 : index
    %31 = vector.load %arg2[%c1_58, %c0_59, %c0_60, %c0_61] : memref<3x3x4x4xf32, #tpu.memory_space<vmem>>, vector<1x1x4x4xf32>
    %32 = vector.shape_cast %31 : vector<1x1x4x4xf32> to vector<4x4xf32>
    %cst_62 = arith.constant dense<0.000000e+00> : vector<512x4xf32>
    %33 = tpu.matmul %30, %32, %cst_62 {dimension_numbers = #tpu.dot_dimension_numbers<[1], [0], [0], [1], [0, 0, 1, 1], [], []>} : vector<512x4xf32>, vector<4x4xf32>, vector<512x4xf32> -> vector<512x4xf32>
    %34 = arith.addf %28, %33 : vector<512x4xf32>
    %c0_63 = arith.constant 0 : index
    %c1_64 = arith.constant 1 : index
    %c1_65 = arith.constant 1 : index
    %c0_66 = arith.constant 0 : index
    %35 = vector.load %arg5[%c0_63, %c1_64, %c1_65, %c0_66] : memref<2x18x18x4xf32, #tpu.memory_space<vmem>>, vector<2x16x16x4xf32>
    %36 = vector.shape_cast %35 : vector<2x16x16x4xf32> to vector<512x4xf32>
    %c1_67 = arith.constant 1 : index
    %c1_68 = arith.constant 1 : index
    %c0_69 = arith.constant 0 : index
    %c0_70 = arith.constant 0 : index
    %37 = vector.load %arg2[%c1_67, %c1_68, %c0_69, %c0_70] : memref<3x3x4x4xf32, #tpu.memory_space<vmem>>, vector<1x1x4x4xf32>
    %38 = vector.shape_cast %37 : vector<1x1x4x4xf32> to vector<4x4xf32>
    %cst_71 = arith.constant dense<0.000000e+00> : vector<512x4xf32>
    %39 = tpu.matmul %36, %38, %cst_71 {dimension_numbers = #tpu.dot_dimension_numbers<[1], [0], [0], [1], [0, 0, 1, 1], [], []>} : vector<512x4xf32>, vector<4x4xf32>, vector<512x4xf32> -> vector<512x4xf32>
    %40 = arith.addf %34, %39 : vector<512x4xf32>
    %c0_72 = arith.constant 0 : index
    %c1_73 = arith.constant 1 : index
    %c2_74 = arith.constant 2 : index
    %c0_75 = arith.constant 0 : index
    %41 = vector.load %arg5[%c0_72, %c1_73, %c2_74, %c0_75] : memref<2x18x18x4xf32, #tpu.memory_space<vmem>>, vector<2x16x16x4xf32>
    %42 = vector.shape_cast %41 : vector<2x16x16x4xf32> to vector<512x4xf32>
    %c1_76 = arith.constant 1 : index
    %c2_77 = arith.constant 2 : index
    %c0_78 = arith.constant 0 : index
    %c0_79 = arith.constant 0 : index
    %43 = vector.load %arg2[%c1_76, %c2_77, %c0_78, %c0_79] : memref<3x3x4x4xf32, #tpu.memory_space<vmem>>, vector<1x1x4x4xf32>
    %44 = vector.shape_cast %43 : vector<1x1x4x4xf32> to vector<4x4xf32>
    %cst_80 = arith.constant dense<0.000000e+00> : vector<512x4xf32>
    %45 = tpu.matmul %42, %44, %cst_80 {dimension_numbers = #tpu.dot_dimension_numbers<[1], [0], [0], [1], [0, 0, 1, 1], [], []>} : vector<512x4xf32>, vector<4x4xf32>, vector<512x4xf32> -> vector<512x4xf32>
    %46 = arith.addf %40, %45 : vector<512x4xf32>
    %c0_81 = arith.constant 0 : index
    %c2_82 = arith.constant 2 : index
    %c0_83 = arith.constant 0 : index
    %c0_84 = arith.constant 0 : index
    %47 = vector.load %arg5[%c0_81, %c2_82, %c0_83, %c0_84] : memref<2x18x18x4xf32, #tpu.memory_space<vmem>>, vector<2x16x16x4xf32>
    %48 = vector.shape_cast %47 : vector<2x16x16x4xf32> to vector<512x4xf32>
    %c2_85 = arith.constant 2 : index
    %c0_86 = arith.constant 0 : index
    %c0_87 = arith.constant 0 : index
    %c0_88 = arith.constant 0 : index
    %49 = vector.load %arg2[%c2_85, %c0_86, %c0_87, %c0_88] : memref<3x3x4x4xf32, #tpu.memory_space<vmem>>, vector<1x1x4x4xf32>
    %50 = vector.shape_cast %49 : vector<1x1x4x4xf32> to vector<4x4xf32>
    %cst_89 = arith.constant dense<0.000000e+00> : vector<512x4xf32>
    %51 = tpu.matmul %48, %50, %cst_89 {dimension_numbers = #tpu.dot_dimension_numbers<[1], [0], [0], [1], [0, 0, 1, 1], [], []>} : vector<512x4xf32>, vector<4x4xf32>, vector<512x4xf32> -> vector<512x4xf32>
    %52 = arith.addf %46, %51 : vector<512x4xf32>
    %c0_90 = arith.constant 0 : index
    %c2_91 = arith.constant 2 : index
    %c1_92 = arith.constant 1 : index
    %c0_93 = arith.constant 0 : index
    %53 = vector.load %arg5[%c0_90, %c2_91, %c1_92, %c0_93] : memref<2x18x18x4xf32, #tpu.memory_space<vmem>>, vector<2x16x16x4xf32>
    %54 = vector.shape_cast %53 : vector<2x16x16x4xf32> to vector<512x4xf32>
    %c2_94 = arith.constant 2 : index
    %c1_95 = arith.constant 1 : index
    %c0_96 = arith.constant 0 : index
    %c0_97 = arith.constant 0 : index
    %55 = vector.load %arg2[%c2_94, %c1_95, %c0_96, %c0_97] : memref<3x3x4x4xf32, #tpu.memory_space<vmem>>, vector<1x1x4x4xf32>
    %56 = vector.shape_cast %55 : vector<1x1x4x4xf32> to vector<4x4xf32>
    %cst_98 = arith.constant dense<0.000000e+00> : vector<512x4xf32>
    %57 = tpu.matmul %54, %56, %cst_98 {dimension_numbers = #tpu.dot_dimension_numbers<[1], [0], [0], [1], [0, 0, 1, 1], [], []>} : vector<512x4xf32>, vector<4x4xf32>, vector<512x4xf32> -> vector<512x4xf32>
    %58 = arith.addf %52, %57 : vector<512x4xf32>
    %c0_99 = arith.constant 0 : index
    %c2_100 = arith.constant 2 : index
    %c2_101 = arith.constant 2 : index
    %c0_102 = arith.constant 0 : index
    %59 = vector.load %arg5[%c0_99, %c2_100, %c2_101, %c0_102] : memref<2x18x18x4xf32, #tpu.memory_space<vmem>>, vector<2x16x16x4xf32>
    %60 = vector.shape_cast %59 : vector<2x16x16x4xf32> to vector<512x4xf32>
    %c2_103 = arith.constant 2 : index
    %c2_104 = arith.constant 2 : index
    %c0_105 = arith.constant 0 : index
    %c0_106 = arith.constant 0 : index
    %61 = vector.load %arg2[%c2_103, %c2_104, %c0_105, %c0_106] : memref<3x3x4x4xf32, #tpu.memory_space<vmem>>, vector<1x1x4x4xf32>
    %62 = vector.shape_cast %61 : vector<1x1x4x4xf32> to vector<4x4xf32>
    %cst_107 = arith.constant dense<0.000000e+00> : vector<512x4xf32>
    %63 = tpu.matmul %60, %62, %cst_107 {dimension_numbers = #tpu.dot_dimension_numbers<[1], [0], [0], [1], [0, 0, 1, 1], [], []>} : vector<512x4xf32>, vector<4x4xf32>, vector<512x4xf32> -> vector<512x4xf32>
    %64 = arith.addf %58, %63 : vector<512x4xf32>
    %65 = vector.shape_cast %64 : vector<512x4xf32> to vector<2x256x4xf32>
    %cst_108 = arith.constant dense<0.000000e+00> : vector<2x4xf32>
    %66 = vector.multi_reduction <add>, %65, %cst_108 [1] : vector<2x256x4xf32> to vector<2x4xf32>
    %67 = vector.shape_cast %66 : vector<2x4xf32> to vector<2x1x4xf32>
    %cst_109 = arith.constant 2.560000e+02 : f32
    %68 = vector.broadcast %cst_109 : f32 to vector<2x1x4xf32>
    %69 = arith.divf %67, %68 : vector<2x1x4xf32>
    %70 = vector.broadcast %69 : vector<2x1x4xf32> to vector<2x256x4xf32>
    %71 = arith.subf %65, %70 : vector<2x256x4xf32>
    %72 = arith.mulf %71, %71 : vector<2x256x4xf32>
    %cst_110 = arith.constant dense<0.000000e+00> : vector<2x4xf32>
    %73 = vector.multi_reduction <add>, %72, %cst_110 [1] : vector<2x256x4xf32> to vector<2x4xf32>
    %74 = vector.shape_cast %73 : vector<2x4xf32> to vector<2x1x4xf32>
    %cst_111 = arith.constant 2.560000e+02 : f32
    %75 = vector.broadcast %cst_111 : f32 to vector<2x1x4xf32>
    %76 = arith.divf %74, %75 : vector<2x1x4xf32>
    %cst_112 = arith.constant 9.99999974E-6 : f32
    %77 = vector.broadcast %cst_112 : f32 to vector<2x1x4xf32>
    %78 = arith.addf %76, %77 : vector<2x1x4xf32>
    %79 = math.rsqrt %78 : vector<2x1x4xf32>
    %80 = vector.broadcast %79 : vector<2x1x4xf32> to vector<2x256x4xf32>
    %81 = arith.mulf %71, %80 : vector<2x256x4xf32>
    %cst_113 = arith.constant 0.000000e+00 : f32
    %82 = vector.broadcast %cst_113 : f32 to vector<2x256x4xf32>
    %83 = arith.maximumf %81, %82 : vector<2x256x4xf32>
    %84 = vector.shape_cast %83 : vector<2x256x4xf32> to vector<2x16x16x4xf32>
    %c0_114 = arith.constant 0 : index
    %c1_115 = arith.constant 1 : index
    %c1_116 = arith.constant 1 : index
    %c0_117 = arith.constant 0 : index
    %85 = vector.load %arg5[%c0_114, %c1_115, %c1_116, %c0_117] : memref<2x18x18x4xf32, #tpu.memory_space<vmem>>, vector<2x16x16x4xf32>
    tpu.vector_store %arg5[%c0_114, %c1_115, %c1_116, %c0_117], %84 {strides = array<i32>} : memref<2x18x18x4xf32, #tpu.memory_space<vmem>>, vector<2x16x16x4xf32>,
    %86 = vector.extract_strided_slice %84 {offsets = [0, 1, 0, 0], sizes = [2, 1, 16, 4], strides = [1, 1, 1, 1]} : vector<2x16x16x4xf32> to vector<2x1x16x4xf32>
    %c0_118 = arith.constant 0 : index
    %c0_119 = arith.constant 0 : index
    %c1_120 = arith.constant 1 : index
    %c0_121 = arith.constant 0 : index
    %87 = vector.load %arg5[%c0_118, %c0_119, %c1_120, %c0_121] : memref<2x18x18x4xf32, #tpu.memory_space<vmem>>, vector<2x1x16x4xf32>
    tpu.vector_store %arg5[%c0_118, %c0_119, %c1_120, %c0_121], %86 {strides = array<i32>} : memref<2x18x18x4xf32, #tpu.memory_space<vmem>>, vector<2x1x16x4xf32>,
    %88 = vector.extract_strided_slice %84 {offsets = [0, 14, 0, 0], sizes = [2, 1, 16, 4], strides = [1, 1, 1, 1]} : vector<2x16x16x4xf32> to vector<2x1x16x4xf32>
    %c0_122 = arith.constant 0 : index
    %c17_123 = arith.constant 17 : index
    %c1_124 = arith.constant 1 : index
    %c0_125 = arith.constant 0 : index
    %89 = vector.load %arg5[%c0_122, %c17_123, %c1_124, %c0_125] : memref<2x18x18x4xf32, #tpu.memory_space<vmem>>, vector<2x1x16x4xf32>
    tpu.vector_store %arg5[%c0_122, %c17_123, %c1_124, %c0_125], %88 {strides = array<i32>} : memref<2x18x18x4xf32, #tpu.memory_space<vmem>>, vector<2x1x16x4xf32>,
    %c0_126 = arith.constant 0 : index
    %c0_127 = arith.constant 0 : index
    %c2_128 = arith.constant 2 : index
    %c0_129 = arith.constant 0 : index
    %90 = vector.load %arg5[%c0_126, %c0_127, %c2_128, %c0_129] : memref<2x18x18x4xf32, #tpu.memory_space<vmem>>, vector<2x18x1x4xf32>
    %c0_130 = arith.constant 0 : index
    %c0_131 = arith.constant 0 : index
    %c0_132 = arith.constant 0 : index
    %c0_133 = arith.constant 0 : index
    %91 = vector.load %arg5[%c0_130, %c0_131, %c0_132, %c0_133] : memref<2x18x18x4xf32, #tpu.memory_space<vmem>>, vector<2x18x1x4xf32>
    tpu.vector_store %arg5[%c0_130, %c0_131, %c0_132, %c0_133], %90 {strides = array<i32>} : memref<2x18x18x4xf32, #tpu.memory_space<vmem>>, vector<2x18x1x4xf32>,
    %c0_134 = arith.constant 0 : index
    %c0_135 = arith.constant 0 : index
    %c15_136 = arith.constant 15 : index
    %c0_137 = arith.constant 0 : index
    %92 = vector.load %arg5[%c0_134, %c0_135, %c15_136, %c0_137] : memref<2x18x18x4xf32, #tpu.memory_space<vmem>>, vector<2x18x1x4xf32>
    %c0_138 = arith.constant 0 : index
    %c0_139 = arith.constant 0 : index
    %c17_140 = arith.constant 17 : index
    %c0_141 = arith.constant 0 : index
    %93 = vector.load %arg5[%c0_138, %c0_139, %c17_140, %c0_141] : memref<2x18x18x4xf32, #tpu.memory_space<vmem>>, vector<2x18x1x4xf32>
    tpu.vector_store %arg5[%c0_138, %c0_139, %c17_140, %c0_141], %92 {strides = array<i32>} : memref<2x18x18x4xf32, #tpu.memory_space<vmem>>, vector<2x18x1x4xf32>,
    %cst_142 = arith.constant 0.000000e+00 : f32
    %94 = vector.broadcast %cst_142 : f32 to vector<512x4xf32>
    %c0_143 = arith.constant 0 : index
    %c0_144 = arith.constant 0 : index
    %c0_145 = arith.constant 0 : index
    %c0_146 = arith.constant 0 : index
    %95 = vector.load %arg5[%c0_143, %c0_144, %c0_145, %c0_146] : memref<2x18x18x4xf32, #tpu.memory_space<vmem>>, vector<2x16x16x4xf32>
    %96 = vector.shape_cast %95 : vector<2x16x16x4xf32> to vector<512x4xf32>
    %c0_147 = arith.constant 0 : index
    %c0_148 = arith.constant 0 : index
    %c0_149 = arith.constant 0 : index
    %c0_150 = arith.constant 0 : index
    %97 = vector.load %arg3[%c0_147, %c0_148, %c0_149, %c0_150] : memref<3x3x4x4xf32, #tpu.memory_space<vmem>>, vector<1x1x4x4xf32>
    %98 = vector.shape_cast %97 : vector<1x1x4x4xf32> to vector<4x4xf32>
    %cst_151 = arith.constant dense<0.000000e+00> : vector<512x4xf32>
    %99 = tpu.matmul %96, %98, %cst_151 {dimension_numbers = #tpu.dot_dimension_numbers<[1], [0], [0], [1], [0, 0, 1, 1], [], []>} : vector<512x4xf32>, vector<4x4xf32>, vector<512x4xf32> -> vector<512x4xf32>
    %100 = arith.addf %94, %99 : vector<512x4xf32>
    %c0_152 = arith.constant 0 : index
    %c0_153 = arith.constant 0 : index
    %c1_154 = arith.constant 1 : index
    %c0_155 = arith.constant 0 : index
    %101 = vector.load %arg5[%c0_152, %c0_153, %c1_154, %c0_155] : memref<2x18x18x4xf32, #tpu.memory_space<vmem>>, vector<2x16x16x4xf32>
    %102 = vector.shape_cast %101 : vector<2x16x16x4xf32> to vector<512x4xf32>
    %c0_156 = arith.constant 0 : index
    %c1_157 = arith.constant 1 : index
    %c0_158 = arith.constant 0 : index
    %c0_159 = arith.constant 0 : index
    %103 = vector.load %arg3[%c0_156, %c1_157, %c0_158, %c0_159] : memref<3x3x4x4xf32, #tpu.memory_space<vmem>>, vector<1x1x4x4xf32>
    %104 = vector.shape_cast %103 : vector<1x1x4x4xf32> to vector<4x4xf32>
    %cst_160 = arith.constant dense<0.000000e+00> : vector<512x4xf32>
    %105 = tpu.matmul %102, %104, %cst_160 {dimension_numbers = #tpu.dot_dimension_numbers<[1], [0], [0], [1], [0, 0, 1, 1], [], []>} : vector<512x4xf32>, vector<4x4xf32>, vector<512x4xf32> -> vector<512x4xf32>
    %106 = arith.addf %100, %105 : vector<512x4xf32>
    %c0_161 = arith.constant 0 : index
    %c0_162 = arith.constant 0 : index
    %c2_163 = arith.constant 2 : index
    %c0_164 = arith.constant 0 : index
    %107 = vector.load %arg5[%c0_161, %c0_162, %c2_163, %c0_164] : memref<2x18x18x4xf32, #tpu.memory_space<vmem>>, vector<2x16x16x4xf32>
    %108 = vector.shape_cast %107 : vector<2x16x16x4xf32> to vector<512x4xf32>
    %c0_165 = arith.constant 0 : index
    %c2_166 = arith.constant 2 : index
    %c0_167 = arith.constant 0 : index
    %c0_168 = arith.constant 0 : index
    %109 = vector.load %arg3[%c0_165, %c2_166, %c0_167, %c0_168] : memref<3x3x4x4xf32, #tpu.memory_space<vmem>>, vector<1x1x4x4xf32>
    %110 = vector.shape_cast %109 : vector<1x1x4x4xf32> to vector<4x4xf32>
    %cst_169 = arith.constant dense<0.000000e+00> : vector<512x4xf32>
    %111 = tpu.matmul %108, %110, %cst_169 {dimension_numbers = #tpu.dot_dimension_numbers<[1], [0], [0], [1], [0, 0, 1, 1], [], []>} : vector<512x4xf32>, vector<4x4xf32>, vector<512x4xf32> -> vector<512x4xf32>
    %112 = arith.addf %106, %111 : vector<512x4xf32>
    %c0_170 = arith.constant 0 : index
    %c1_171 = arith.constant 1 : index
    %c0_172 = arith.constant 0 : index
    %c0_173 = arith.constant 0 : index
    %113 = vector.load %arg5[%c0_170, %c1_171, %c0_172, %c0_173] : memref<2x18x18x4xf32, #tpu.memory_space<vmem>>, vector<2x16x16x4xf32>
    %114 = vector.shape_cast %113 : vector<2x16x16x4xf32> to vector<512x4xf32>
    %c1_174 = arith.constant 1 : index
    %c0_175 = arith.constant 0 : index
    %c0_176 = arith.constant 0 : index
    %c0_177 = arith.constant 0 : index
    %115 = vector.load %arg3[%c1_174, %c0_175, %c0_176, %c0_177] : memref<3x3x4x4xf32, #tpu.memory_space<vmem>>, vector<1x1x4x4xf32>
    %116 = vector.shape_cast %115 : vector<1x1x4x4xf32> to vector<4x4xf32>
    %cst_178 = arith.constant dense<0.000000e+00> : vector<512x4xf32>
    %117 = tpu.matmul %114, %116, %cst_178 {dimension_numbers = #tpu.dot_dimension_numbers<[1], [0], [0], [1], [0, 0, 1, 1], [], []>} : vector<512x4xf32>, vector<4x4xf32>, vector<512x4xf32> -> vector<512x4xf32>
    %118 = arith.addf %112, %117 : vector<512x4xf32>
    %c0_179 = arith.constant 0 : index
    %c1_180 = arith.constant 1 : index
    %c1_181 = arith.constant 1 : index
    %c0_182 = arith.constant 0 : index
    %119 = vector.load %arg5[%c0_179, %c1_180, %c1_181, %c0_182] : memref<2x18x18x4xf32, #tpu.memory_space<vmem>>, vector<2x16x16x4xf32>
    %120 = vector.shape_cast %119 : vector<2x16x16x4xf32> to vector<512x4xf32>
    %c1_183 = arith.constant 1 : index
    %c1_184 = arith.constant 1 : index
    %c0_185 = arith.constant 0 : index
    %c0_186 = arith.constant 0 : index
    %121 = vector.load %arg3[%c1_183, %c1_184, %c0_185, %c0_186] : memref<3x3x4x4xf32, #tpu.memory_space<vmem>>, vector<1x1x4x4xf32>
    %122 = vector.shape_cast %121 : vector<1x1x4x4xf32> to vector<4x4xf32>
    %cst_187 = arith.constant dense<0.000000e+00> : vector<512x4xf32>
    %123 = tpu.matmul %120, %122, %cst_187 {dimension_numbers = #tpu.dot_dimension_numbers<[1], [0], [0], [1], [0, 0, 1, 1], [], []>} : vector<512x4xf32>, vector<4x4xf32>, vector<512x4xf32> -> vector<512x4xf32>
    %124 = arith.addf %118, %123 : vector<512x4xf32>
    %c0_188 = arith.constant 0 : index
    %c1_189 = arith.constant 1 : index
    %c2_190 = arith.constant 2 : index
    %c0_191 = arith.constant 0 : index
    %125 = vector.load %arg5[%c0_188, %c1_189, %c2_190, %c0_191] : memref<2x18x18x4xf32, #tpu.memory_space<vmem>>, vector<2x16x16x4xf32>
    %126 = vector.shape_cast %125 : vector<2x16x16x4xf32> to vector<512x4xf32>
    %c1_192 = arith.constant 1 : index
    %c2_193 = arith.constant 2 : index
    %c0_194 = arith.constant 0 : index
    %c0_195 = arith.constant 0 : index
    %127 = vector.load %arg3[%c1_192, %c2_193, %c0_194, %c0_195] : memref<3x3x4x4xf32, #tpu.memory_space<vmem>>, vector<1x1x4x4xf32>
    %128 = vector.shape_cast %127 : vector<1x1x4x4xf32> to vector<4x4xf32>
    %cst_196 = arith.constant dense<0.000000e+00> : vector<512x4xf32>
    %129 = tpu.matmul %126, %128, %cst_196 {dimension_numbers = #tpu.dot_dimension_numbers<[1], [0], [0], [1], [0, 0, 1, 1], [], []>} : vector<512x4xf32>, vector<4x4xf32>, vector<512x4xf32> -> vector<512x4xf32>
    %130 = arith.addf %124, %129 : vector<512x4xf32>
    %c0_197 = arith.constant 0 : index
    %c2_198 = arith.constant 2 : index
    %c0_199 = arith.constant 0 : index
    %c0_200 = arith.constant 0 : index
    %131 = vector.load %arg5[%c0_197, %c2_198, %c0_199, %c0_200] : memref<2x18x18x4xf32, #tpu.memory_space<vmem>>, vector<2x16x16x4xf32>
    %132 = vector.shape_cast %131 : vector<2x16x16x4xf32> to vector<512x4xf32>
    %c2_201 = arith.constant 2 : index
    %c0_202 = arith.constant 0 : index
    %c0_203 = arith.constant 0 : index
    %c0_204 = arith.constant 0 : index
    %133 = vector.load %arg3[%c2_201, %c0_202, %c0_203, %c0_204] : memref<3x3x4x4xf32, #tpu.memory_space<vmem>>, vector<1x1x4x4xf32>
    %134 = vector.shape_cast %133 : vector<1x1x4x4xf32> to vector<4x4xf32>
    %cst_205 = arith.constant dense<0.000000e+00> : vector<512x4xf32>
    %135 = tpu.matmul %132, %134, %cst_205 {dimension_numbers = #tpu.dot_dimension_numbers<[1], [0], [0], [1], [0, 0, 1, 1], [], []>} : vector<512x4xf32>, vector<4x4xf32>, vector<512x4xf32> -> vector<512x4xf32>
    %136 = arith.addf %130, %135 : vector<512x4xf32>
    %c0_206 = arith.constant 0 : index
    %c2_207 = arith.constant 2 : index
    %c1_208 = arith.constant 1 : index
    %c0_209 = arith.constant 0 : index
    %137 = vector.load %arg5[%c0_206, %c2_207, %c1_208, %c0_209] : memref<2x18x18x4xf32, #tpu.memory_space<vmem>>, vector<2x16x16x4xf32>
    %138 = vector.shape_cast %137 : vector<2x16x16x4xf32> to vector<512x4xf32>
    %c2_210 = arith.constant 2 : index
    %c1_211 = arith.constant 1 : index
    %c0_212 = arith.constant 0 : index
    %c0_213 = arith.constant 0 : index
    %139 = vector.load %arg3[%c2_210, %c1_211, %c0_212, %c0_213] : memref<3x3x4x4xf32, #tpu.memory_space<vmem>>, vector<1x1x4x4xf32>
    %140 = vector.shape_cast %139 : vector<1x1x4x4xf32> to vector<4x4xf32>
    %cst_214 = arith.constant dense<0.000000e+00> : vector<512x4xf32>
    %141 = tpu.matmul %138, %140, %cst_214 {dimension_numbers = #tpu.dot_dimension_numbers<[1], [0], [0], [1], [0, 0, 1, 1], [], []>} : vector<512x4xf32>, vector<4x4xf32>, vector<512x4xf32> -> vector<512x4xf32>
    %142 = arith.addf %136, %141 : vector<512x4xf32>
    %c0_215 = arith.constant 0 : index
    %c2_216 = arith.constant 2 : index
    %c2_217 = arith.constant 2 : index
    %c0_218 = arith.constant 0 : index
    %143 = vector.load %arg5[%c0_215, %c2_216, %c2_217, %c0_218] : memref<2x18x18x4xf32, #tpu.memory_space<vmem>>, vector<2x16x16x4xf32>
    %144 = vector.shape_cast %143 : vector<2x16x16x4xf32> to vector<512x4xf32>
    %c2_219 = arith.constant 2 : index
    %c2_220 = arith.constant 2 : index
    %c0_221 = arith.constant 0 : index
    %c0_222 = arith.constant 0 : index
    %145 = vector.load %arg3[%c2_219, %c2_220, %c0_221, %c0_222] : memref<3x3x4x4xf32, #tpu.memory_space<vmem>>, vector<1x1x4x4xf32>
    %146 = vector.shape_cast %145 : vector<1x1x4x4xf32> to vector<4x4xf32>
    %cst_223 = arith.constant dense<0.000000e+00> : vector<512x4xf32>
    %147 = tpu.matmul %144, %146, %cst_223 {dimension_numbers = #tpu.dot_dimension_numbers<[1], [0], [0], [1], [0, 0, 1, 1], [], []>} : vector<512x4xf32>, vector<4x4xf32>, vector<512x4xf32> -> vector<512x4xf32>
    %148 = arith.addf %142, %147 : vector<512x4xf32>
    %149 = vector.shape_cast %148 : vector<512x4xf32> to vector<2x256x4xf32>
    %cst_224 = arith.constant dense<0.000000e+00> : vector<2x4xf32>
    %150 = vector.multi_reduction <add>, %149, %cst_224 [1] : vector<2x256x4xf32> to vector<2x4xf32>
    %151 = vector.shape_cast %150 : vector<2x4xf32> to vector<2x1x4xf32>
    %cst_225 = arith.constant 2.560000e+02 : f32
    %152 = vector.broadcast %cst_225 : f32 to vector<2x1x4xf32>
    %153 = arith.divf %151, %152 : vector<2x1x4xf32>
    %154 = vector.broadcast %153 : vector<2x1x4xf32> to vector<2x256x4xf32>
    %155 = arith.subf %149, %154 : vector<2x256x4xf32>
    %156 = arith.mulf %155, %155 : vector<2x256x4xf32>
    %cst_226 = arith.constant dense<0.000000e+00> : vector<2x4xf32>
    %157 = vector.multi_reduction <add>, %156, %cst_226 [1] : vector<2x256x4xf32> to vector<2x4xf32>
    %158 = vector.shape_cast %157 : vector<2x4xf32> to vector<2x1x4xf32>
    %cst_227 = arith.constant 2.560000e+02 : f32
    %159 = vector.broadcast %cst_227 : f32 to vector<2x1x4xf32>
    %160 = arith.divf %158, %159 : vector<2x1x4xf32>
    %cst_228 = arith.constant 9.99999974E-6 : f32
    %161 = vector.broadcast %cst_228 : f32 to vector<2x1x4xf32>
    %162 = arith.addf %160, %161 : vector<2x1x4xf32>
    %163 = math.rsqrt %162 : vector<2x1x4xf32>
    %164 = vector.broadcast %163 : vector<2x1x4xf32> to vector<2x256x4xf32>
    %165 = arith.mulf %155, %164 : vector<2x256x4xf32>
    %166 = vector.shape_cast %165 : vector<2x256x4xf32> to vector<2x16x16x4xf32>
    %167 = arith.addf %0, %166 : vector<2x16x16x4xf32>
    %c0_229 = arith.constant 0 : index
    %c0_230 = arith.constant 0 : index
    %c0_231 = arith.constant 0 : index
    %c0_232 = arith.constant 0 : index
    %168 = vector.load %arg4[%c0_229, %c0_230, %c0_231, %c0_232] : memref<2x16x16x4xf32, #tpu.memory_space<vmem>>, vector<2x16x16x4xf32>
    tpu.vector_store %arg4[%c0_229, %c0_230, %c0_231, %c0_232], %167 {strides = array<i32>} : memref<2x16x16x4xf32, #tpu.memory_space<vmem>>, vector<2x16x16x4xf32>,
    return
  }
  func.func @transform_0(%arg0: i32) -> (i32, i32, i32, i32) {
    %c0_i32 = arith.constant 0 : i32
    %c0_i32_0 = arith.constant 0 : i32
    %c0_i32_1 = arith.constant 0 : i32
    %c0_i32_2 = arith.constant 0 : i32
    return %arg0, %c0_i32, %c0_i32_0, %c0_i32_1 : i32, i32, i32, i32
  }
  func.func @transform_1(%arg0: i32) -> (i32, i32, i32, i32) {
    %c0_i32 = arith.constant 0 : i32
    %c0_i32_0 = arith.constant 0 : i32
    %c0_i32_1 = arith.constant 0 : i32
    %c0_i32_2 = arith.constant 0 : i32
    %c0_i32_3 = arith.constant 0 : i32
    return %c0_i32, %c0_i32_0, %c0_i32_1, %c0_i32_2 : i32, i32, i32, i32
  }
  func.func @transform_2(%arg0: i32) -> (i32, i32, i32, i32) {
    %c0_i32 = arith.constant 0 : i32
    %c0_i32_0 = arith.constant 0 : i32
    %c0_i32_1 = arith.constant 0 : i32
    %c0_i32_2 = arith.constant 0 : i32
    %c0_i32_3 = arith.constant 0 : i32
    return %c0_i32, %c0_i32_0, %c0_i32_1, %c0_i32_2 : i32, i32, i32, i32
  }
  func.func @transform_3(%arg0: i32) -> (i32, i32, i32, i32) {
    %c0_i32 = arith.constant 0 : i32
    %c0_i32_0 = arith.constant 0 : i32
    %c0_i32_1 = arith.constant 0 : i32
    %c0_i32_2 = arith.constant 0 : i32
    return %arg0, %c0_i32, %c0_i32_0, %c0_i32_1 : i32, i32, i32, i32
  }
}

</mosaic_0001>

<llo_original>
// kernel: tpu_custom_call.1
$region0: #{tpu_custom_call.1}
  #allocation0 [shape = 'u32[]', space=smem, size = 0x4, offset = 0x4, fixed_abs, tag = 'smem constant byte address 0x4 - core index']
  #allocation1 [shape = 'u32[144,128]{1,0:T(1,128)}', space=vmem, size = 0x12000, scoped, tag = 'internal scratch']
  #allocation2 [shape = 'f32[2,18,18,4]{3,2,1,0:T(8,128)}', space=vmem, size = 0x6c000, scoped, tag = 'scratch operand']
  %s0 = inlined_call_operand.vmem [shape: f32[2,16,16,4], index: 0, kind: input, shape index: {}]
  %s1 = inlined_call_operand.vmem [shape: f32[3,3,4,4], index: 1, kind: input, shape index: {}]
  %s2 = inlined_call_operand.vmem [shape: f32[3,3,4,4], index: 2, kind: input, shape index: {}]
  %s3 = inlined_call_operand.vmem [shape: f32[2,16,16,4], index: 3, kind: output, shape index: {}]
  %s4 = sld [smem:[#allocation0]]
  $region22: #{tpu_custom_call.1} parent=0
    _
  %s6 = ssub.s32 1, %s4
  %s7 = scalar_select 0, %s6, %s4
  // Predicated region
  $region2: #{tpu_custom_call.1} parent=0 // pred_check
    _
  $region3: #{tpu_custom_call.1} parent=0 // pred_check_branch
    %9 = sbr.rel (0) target = $region5
  $region4: #{tpu_custom_call.1} parent=0 // pred_region
    _
  $region5: #{tpu_custom_call.1} parent=0 // pred_fallthru
    _
  // Predicated region
  $region6: #{tpu_custom_call.1} parent=0 // pred_check
    _
  $region7: #{tpu_custom_call.1} parent=0 // pred_check_branch
    %11 = sbr.rel (0) target = $region9
  $region8: #{tpu_custom_call.1} parent=0 // pred_region
    _
  $region9: #{tpu_custom_call.1} parent=0 // pred_fallthru
    _
  // Predicated region
  $region10: #{tpu_custom_call.1} parent=0 // pred_check
    _
  $region11: #{tpu_custom_call.1} parent=0 // pred_check_branch
    %13 = sbr.rel (0) target = $region13
  $region12: #{tpu_custom_call.1} parent=0 // pred_region
    _
  $region13: #{tpu_custom_call.1} parent=0 // pred_fallthru
    _
  %v14 = vld [vmem:[%s0] sm:$0xff]
  %v15 = vld [vmem:[%s0 + $0x8] sm:$0xff]
  %v16 = vld [vmem:[%s0 + $0x10] sm:$0xff]
  %v17 = vld [vmem:[%s0 + $0x18] sm:$0xff]
  %v18 = vld [vmem:[%s0 + $0x20] sm:$0xff]
  %v19 = vld [vmem:[%s0 + $0x28] sm:$0xff]
  %v20 = vld [vmem:[%s0 + $0x30] sm:$0xff]
  %v21 = vld [vmem:[%s0 + $0x38] sm:$0xff]
  %v22 = vld [vmem:[%s0 + $0x40] sm:$0xff]
  %v23 = vld [vmem:[%s0 + $0x48] sm:$0xff]
  %v24 = vld [vmem:[%s0 + $0x50] sm:$0xff]
  %v25 = vld [vmem:[%s0 + $0x58] sm:$0xff]
  %v26 = vld [vmem:[%s0 + $0x60] sm:$0xff]
  %v27 = vld [vmem:[%s0 + $0x68] sm:$0xff]
  %v28 = vld [vmem:[%s0 + $0x70] sm:$0xff]
  %v29 = vld [vmem:[%s0 + $0x78] sm:$0xff]
  %v30 = vld [vmem:[%s0 + $0x80] sm:$0xff]
  %v31 = vld [vmem:[%s0 + $0x88] sm:$0xff]
  %v32 = vld [vmem:[%s0 + $0x90] sm:$0xff]
  %v33 = vld [vmem:[%s0 + $0x98] sm:$0xff]
  %v34 = vld [vmem:[%s0 + $0xa0] sm:$0xff]
  %v35 = vld [vmem:[%s0 + $0xa8] sm:$0xff]
  %v36 = vld [vmem:[%s0 + $0xb0] sm:$0xff]
  %v37 = vld [vmem:[%s0 + $0xb8] sm:$0xff]
  %v38 = vld [vmem:[%s0 + $0xc0] sm:$0xff]
  %v39 = vld [vmem:[%s0 + $0xc8] sm:$0xff]
  %v40 = vld [vmem:[%s0 + $0xd0] sm:$0xff]
  %v41 = vld [vmem:[%s0 + $0xd8] sm:$0xff]
  %v42 = vld [vmem:[%s0 + $0xe0] sm:$0xff]
  %v43 = vld [vmem:[%s0 + $0xe8] sm:$0xff]
  %v44 = vld [vmem:[%s0 + $0xf0] sm:$0xff]
  %v45 = vld [vmem:[%s0 + $0xf8] sm:$0xff]
  %v46 = vld [vmem:[%s0 + $0x100] sm:$0xff]
  %v47 = vld [vmem:[%s0 + $0x108] sm:$0xff]
  %v48 = vld [vmem:[%s0 + $0x110] sm:$0xff]
  %v49 = vld [vmem:[%s0 + $0x118] sm:$0xff]
  %v50 = vld [vmem:[%s0 + $0x120] sm:$0xff]
  %v51 = vld [vmem:[%s0 + $0x128] sm:$0xff]
  %v52 = vld [vmem:[%s0 + $0x130] sm:$0xff]
  %v53 = vld [vmem:[%s0 + $0x138] sm:$0xff]
  %v54 = vld [vmem:[%s0 + $0x140] sm:$0xff]
  %v55 = vld [vmem:[%s0 + $0x148] sm:$0xff]
  %v56 = vld [vmem:[%s0 + $0x150] sm:$0xff]
  %v57 = vld [vmem:[%s0 + $0x158] sm:$0xff]
  %v58 = vld [vmem:[%s0 + $0x160] sm:$0xff]
  %v59 = vld [vmem:[%s0 + $0x168] sm:$0xff]
  %v60 = vld [vmem:[%s0 + $0x170] sm:$0xff]
  %v61 = vld [vmem:[%s0 + $0x178] sm:$0xff]
  %v62 = vld [vmem:[%s0 + $0x180] sm:$0xff]
  %v63 = vld [vmem:[%s0 + $0x188] sm:$0xff]
  %v64 = vld [vmem:[%s0 + $0x190] sm:$0xff]
  %v65 = vld [vmem:[%s0 + $0x198] sm:$0xff]
  %v66 = vld [vmem:[%s0 + $0x1a0] sm:$0xff]
  %v67 = vld [vmem:[%s0 + $0x1a8] sm:$0xff]
  %v68 = vld [vmem:[%s0 + $0x1b0] sm:$0xff]
  %v69 = vld [vmem:[%s0 + $0x1b8] sm:$0xff]
  %v70 = vld [vmem:[%s0 + $0x1c0] sm:$0xff]
  %v71 = vld [vmem:[%s0 + $0x1c8] sm:$0xff]
  %v72 = vld [vmem:[%s0 + $0x1d0] sm:$0xff]
  %v73 = vld [vmem:[%s0 + $0x1d8] sm:$0xff]
  %v74 = vld [vmem:[%s0 + $0x1e0] sm:$0xff]
  %v75 = vld [vmem:[%s0 + $0x1e8] sm:$0xff]
  %v76 = vld [vmem:[%s0 + $0x1f0] sm:$0xff]
  %v77 = vld [vmem:[%s0 + $0x1f8] sm:$0xff]
  %s78 = scalar_lea.vmem [#allocation2], 24
  %vm79 = vcmask 31744
  %80 = vst.msk [vmem:[%s78 + $0x1] sm:$0xff] %vm79, %v14
  %81 = vst.msk [vmem:[%s78 + $0x9] sm:$0xff] %vm79, %v15
  %82 = vst.msk [vmem:[%s78 + $0x19] sm:$0xff] %vm79, %v16
  %83 = vst.msk [vmem:[%s78 + $0x21] sm:$0xff] %vm79, %v17
  %84 = vst.msk [vmem:[%s78 + $0x31] sm:$0xff] %vm79, %v18
  %85 = vst.msk [vmem:[%s78 + $0x39] sm:$0xff] %vm79, %v19
  %86 = vst.msk [vmem:[%s78 + $0x49] sm:$0xff] %vm79, %v20
  %87 = vst.msk [vmem:[%s78 + $0x51] sm:$0xff] %vm79, %v21
  %88 = vst.msk [vmem:[%s78 + $0x61] sm:$0xff] %vm79, %v22
  %89 = vst.msk [vmem:[%s78 + $0x69] sm:$0xff] %vm79, %v23
  %90 = vst.msk [vmem:[%s78 + $0x79] sm:$0xff] %vm79, %v24
  %91 = vst.msk [vmem:[%s78 + $0x81] sm:$0xff] %vm79, %v25
  %92 = vst.msk [vmem:[%s78 + $0x91] sm:$0xff] %vm79, %v26
  %93 = vst.msk [vmem:[%s78 + $0x99] sm:$0xff] %vm79, %v27
  %94 = vst.msk [vmem:[%s78 + $0xa9] sm:$0xff] %vm79, %v28
  %95 = vst.msk [vmem:[%s78 + $0xb1] sm:$0xff] %vm79, %v29
  %96 = vst.msk [vmem:[%s78 + $0xc1] sm:$0xff] %vm79, %v30
  %97 = vst.msk [vmem:[%s78 + $0xc9] sm:$0xff] %vm79, %v31
  %98 = vst.msk [vmem:[%s78 + $0xd9] sm:$0xff] %vm79, %v32
  %99 = vst.msk [vmem:[%s78 + $0xe1] sm:$0xff] %vm79, %v33
  %100 = vst.msk [vmem:[%s78 + $0xf1] sm:$0xff] %vm79, %v34
  %101 = vst.msk [vmem:[%s78 + $0xf9] sm:$0xff] %vm79, %v35
  %102 = vst.msk [vmem:[%s78 + $0x109] sm:$0xff] %vm79, %v36
  %103 = vst.msk [vmem:[%s78 + $0x111] sm:$0xff] %vm79, %v37
  %104 = vst.msk [vmem:[%s78 + $0x121] sm:$0xff] %vm79, %v38
  %105 = vst.msk [vmem:[%s78 + $0x129] sm:$0xff] %vm79, %v39
  %106 = vst.msk [vmem:[%s78 + $0x139] sm:$0xff] %vm79, %v40
  %107 = vst.msk [vmem:[%s78 + $0x141] sm:$0xff] %vm79, %v41
  %108 = vst.msk [vmem:[%s78 + $0x151] sm:$0xff] %vm79, %v42
  %109 = vst.msk [vmem:[%s78 + $0x159] sm:$0xff] %vm79, %v43
  %110 = vst.msk [vmem:[%s78 + $0x169] sm:$0xff] %vm79, %v44
  %111 = vst.msk [vmem:[%s78 + $0x171] sm:$0xff] %vm79, %v45
  %112 = vst.msk [vmem:[%s78 + $0x1b1] sm:$0xff] %vm79, %v46
  %113 = vst.msk [vmem:[%s78 + $0x1b9] sm:$0xff] %vm79, %v47
  %114 = vst.msk [vmem:[%s78 + $0x1c9] sm:$0xff] %vm79, %v48
  %115 = vst.msk [vmem:[%s78 + $0x1d1] sm:$0xff] %vm79, %v49
  %116 = vst.msk [vmem:[%s78 + $0x1e1] sm:$0xff] %vm79, %v50
  %117 = vst.msk [vmem:[%s78 + $0x1e9] sm:$0xff] %vm79, %v51
  %118 = vst.msk [vmem:[%s78 + $0x1f9] sm:$0xff] %vm79, %v52
  %119 = vst.msk [vmem:[%s78 + $0x201] sm:$0xff] %vm79, %v53
  %120 = vst.msk [vmem:[%s78 + $0x211] sm:$0xff] %vm79, %v54
  %121 = vst.msk [vmem:[%s78 + $0x219] sm:$0xff] %vm79, %v55
  %122 = vst.msk [vmem:[%s78 + $0x229] sm:$0xff] %vm79, %v56
  %123 = vst.msk [vmem:[%s78 + $0x231] sm:$0xff] %vm79, %v57
  %124 = vst.msk [vmem:[%s78 + $0x241] sm:$0xff] %vm79, %v58
  %125 = vst.msk [vmem:[%s78 + $0x249] sm:$0xff] %vm79, %v59
  %126 = vst.msk [vmem:[%s78 + $0x259] sm:$0xff] %vm79, %v60
  %127 = vst.msk [vmem:[%s78 + $0x261] sm:$0xff] %vm79, %v61
  %128 = vst.msk [vmem:[%s78 + $0x271] sm:$0xff] %vm79, %v62
  %129 = vst.msk [vmem:[%s78 + $0x279] sm:$0xff] %vm79, %v63
  %130 = vst.msk [vmem:[%s78 + $0x289] sm:$0xff] %vm79, %v64
  %131 = vst.msk [vmem:[%s78 + $0x291] sm:$0xff] %vm79, %v65
  %132 = vst.msk [vmem:[%s78 + $0x2a1] sm:$0xff] %vm79, %v66
  %133 = vst.msk [vmem:[%s78 + $0x2a9] sm:$0xff] %vm79, %v67
  %134 = vst.msk [vmem:[%s78 + $0x2b9] sm:$0xff] %vm79, %v68
  %135 = vst.msk [vmem:[%s78 + $0x2c1] sm:$0xff] %vm79, %v69
  %136 = vst.msk [vmem:[%s78 + $0x2d1] sm:$0xff] %vm79, %v70
  %137 = vst.msk [vmem:[%s78 + $0x2d9] sm:$0xff] %vm79, %v71
  %138 = vst.msk [vmem:[%s78 + $0x2e9] sm:$0xff] %vm79, %v72
  %139 = vst.msk [vmem:[%s78 + $0x2f1] sm:$0xff] %vm79, %v73
  %140 = vst.msk [vmem:[%s78 + $0x301] sm:$0xff] %vm79, %v74
  %141 = vst.msk [vmem:[%s78 + $0x309] sm:$0xff] %vm79, %v75
  %142 = vst.msk [vmem:[%s78 + $0x319] sm:$0xff] %vm79, %v76
  %143 = vst.msk [vmem:[%s78 + $0x321] sm:$0xff] %vm79, %v77
  %144 = vst.msk [vmem:[#allocation2 + $0x1] sm:$0xff] %vm79, %v16
  %145 = vst.msk [vmem:[#allocation2 + $0x9] sm:$0xff] %vm79, %v17
  %146 = vst.msk [vmem:[#allocation2 + $0x1b1] sm:$0xff] %vm79, %v48
  %147 = vst.msk [vmem:[#allocation2 + $0x1b9] sm:$0xff] %vm79, %v49
  %s148 = scalar_lea.vmem [#allocation2], 408
  %149 = vst.msk [vmem:[%s148 + $0x1] sm:$0xff] %vm79, %v42
  %150 = vst.msk [vmem:[%s148 + $0x9] sm:$0xff] %vm79, %v43
  %151 = vst.msk [vmem:[%s148 + $0x1b1] sm:$0xff] %vm79, %v74
  %152 = vst.msk [vmem:[%s148 + $0x1b9] sm:$0xff] %vm79, %v75
  %v153 = vld [vmem:[#allocation2 + $0x2] sm:$0x1]
  %v154 = vld [vmem:[#allocation2 + $0x1a] sm:$0x1]
  %v155 = vld [vmem:[#allocation2 + $0x32] sm:$0x1]
  %v156 = vld [vmem:[#allocation2 + $0x4a] sm:$0x1]
  %v157 = vld [vmem:[#allocation2 + $0x62] sm:$0x1]
  %v158 = vld [vmem:[#allocation2 + $0x7a] sm:$0x1]
  %v159 = vld [vmem:[#allocation2 + $0x92] sm:$0x1]
  %v160 = vld [vmem:[#allocation2 + $0xaa] sm:$0x1]
  %v161 = vld [vmem:[#allocation2 + $0xc2] sm:$0x1]
  %v162 = vld [vmem:[#allocation2 + $0xda] sm:$0x1]
  %v163 = vld [vmem:[#allocation2 + $0xf2] sm:$0x1]
  %v164 = vld [vmem:[#allocation2 + $0x10a] sm:$0x1]
  %v165 = vld [vmem:[#allocation2 + $0x122] sm:$0x1]
  %v166 = vld [vmem:[#allocation2 + $0x13a] sm:$0x1]
  %v167 = vld [vmem:[#allocation2 + $0x152] sm:$0x1]
  %v168 = vld [vmem:[#allocation2 + $0x16a] sm:$0x1]
  %v169 = vld [vmem:[#allocation2 + $0x182] sm:$0x1]
  %v170 = vld [vmem:[#allocation2 + $0x19a] sm:$0x1]
  %v171 = vld [vmem:[#allocation2 + $0x1b2] sm:$0x1]
  %v172 = vld [vmem:[#allocation2 + $0x1ca] sm:$0x1]
  %v173 = vld [vmem:[#allocation2 + $0x1e2] sm:$0x1]
  %v174 = vld [vmem:[#allocation2 + $0x1fa] sm:$0x1]
  %v175 = vld [vmem:[#allocation2 + $0x212] sm:$0x1]
  %v176 = vld [vmem:[#allocation2 + $0x22a] sm:$0x1]
  %v177 = vld [vmem:[#allocation2 + $0x242] sm:$0x1]
  %v178 = vld [vmem:[#allocation2 + $0x25a] sm:$0x1]
  %v179 = vld [vmem:[#allocation2 + $0x272] sm:$0x1]
  %v180 = vld [vmem:[#allocation2 + $0x28a] sm:$0x1]
  %v181 = vld [vmem:[#allocation2 + $0x2a2] sm:$0x1]
  %v182 = vld [vmem:[#allocation2 + $0x2ba] sm:$0x1]
  %v183 = vld [vmem:[#allocation2 + $0x2d2] sm:$0x1]
  %v184 = vld [vmem:[#allocation2 + $0x2ea] sm:$0x1]
  %v185 = vld [vmem:[#allocation2 + $0x302] sm:$0x1]
  %v186 = vld [vmem:[#allocation2 + $0x31a] sm:$0x1]
  %v187 = vld [vmem:[#allocation2 + $0x332] sm:$0x1]
  %v188 = vld [vmem:[#allocation2 + $0x34a] sm:$0x1]
  %vm189 = vcmask 24576
  %190 = vst.msk [vmem:[#allocation2] sm:$0x1] %vm189, %v153
  %191 = vst.msk [vmem:[#allocation2 + $0x18] sm:$0x1] %vm189, %v154
  %192 = vst.msk [vmem:[#allocation2 + $0x30] sm:$0x1] %vm189, %v155
  %193 = vst.msk [vmem:[#allocation2 + $0x48] sm:$0x1] %vm189, %v156
  %194 = vst.msk [vmem:[#allocation2 + $0x60] sm:$0x1] %vm189, %v157
  %195 = vst.msk [vmem:[#allocation2 + $0x78] sm:$0x1] %vm189, %v158
  %196 = vst.msk [vmem:[#allocation2 + $0x90] sm:$0x1] %vm189, %v159
  %197 = vst.msk [vmem:[#allocation2 + $0xa8] sm:$0x1] %vm189, %v160
  %198 = vst.msk [vmem:[#allocation2 + $0xc0] sm:$0x1] %vm189, %v161
  %199 = vst.msk [vmem:[#allocation2 + $0xd8] sm:$0x1] %vm189, %v162
  %200 = vst.msk [vmem:[#allocation2 + $0xf0] sm:$0x1] %vm189, %v163
  %201 = vst.msk [vmem:[#allocation2 + $0x108] sm:$0x1] %vm189, %v164
  %202 = vst.msk [vmem:[#allocation2 + $0x120] sm:$0x1] %vm189, %v165
  %203 = vst.msk [vmem:[#allocation2 + $0x138] sm:$0x1] %vm189, %v166
  %204 = vst.msk [vmem:[#allocation2 + $0x150] sm:$0x1] %vm189, %v167
  %205 = vst.msk [vmem:[#allocation2 + $0x168] sm:$0x1] %vm189, %v168
  %206 = vst.msk [vmem:[#allocation2 + $0x180] sm:$0x1] %vm189, %v169
  %207 = vst.msk [vmem:[#allocation2 + $0x198] sm:$0x1] %vm189, %v170
  %208 = vst.msk [vmem:[#allocation2 + $0x1b0] sm:$0x1] %vm189, %v171
  %209 = vst.msk [vmem:[#allocation2 + $0x1c8] sm:$0x1] %vm189, %v172
  %210 = vst.msk [vmem:[#allocation2 + $0x1e0] sm:$0x1] %vm189, %v173
  %211 = vst.msk [vmem:[#allocation2 + $0x1f8] sm:$0x1] %vm189, %v174
  %212 = vst.msk [vmem:[#allocation2 + $0x210] sm:$0x1] %vm189, %v175
  %213 = vst.msk [vmem:[#allocation2 + $0x228] sm:$0x1] %vm189, %v176
  %214 = vst.msk [vmem:[#allocation2 + $0x240] sm:$0x1] %vm189, %v177
  %215 = vst.msk [vmem:[#allocation2 + $0x258] sm:$0x1] %vm189, %v178
  %216 = vst.msk [vmem:[#allocation2 + $0x270] sm:$0x1] %vm189, %v179
  %217 = vst.msk [vmem:[#allocation2 + $0x288] sm:$0x1] %vm189, %v180
  %218 = vst.msk [vmem:[#allocation2 + $0x2a0] sm:$0x1] %vm189, %v181
  %219 = vst.msk [vmem:[#allocation2 + $0x2b8] sm:$0x1] %vm189, %v182
  %220 = vst.msk [vmem:[#allocation2 + $0x2d0] sm:$0x1] %vm189, %v183
  %221 = vst.msk [vmem:[#allocation2 + $0x2e8] sm:$0x1] %vm189, %v184
  %222 = vst.msk [vmem:[#allocation2 + $0x300] sm:$0x1] %vm189, %v185
  %223 = vst.msk [vmem:[#allocation2 + $0x318] sm:$0x1] %vm189, %v186
  %224 = vst.msk [vmem:[#allocation2 + $0x330] sm:$0x1] %vm189, %v187
  %225 = vst.msk [vmem:[#allocation2 + $0x348] sm:$0x1] %vm189, %v188
  %v226 = vld [vmem:[#allocation2 + $0xf] sm:$0x1]
  %v227 = vld [vmem:[#allocation2 + $0x27] sm:$0x1]
  %v228 = vld [vmem:[#allocation2 + $0x3f] sm:$0x1]
  %v229 = vld [vmem:[#allocation2 + $0x57] sm:$0x1]
  %v230 = vld [vmem:[#allocation2 + $0x6f] sm:$0x1]
  %v231 = vld [vmem:[#allocation2 + $0x87] sm:$0x1]
  %v232 = vld [vmem:[#allocation2 + $0x9f] sm:$0x1]
  %v233 = vld [vmem:[#allocation2 + $0xb7] sm:$0x1]
  %v234 = vld [vmem:[#allocation2 + $0xcf] sm:$0x1]
  %v235 = vld [vmem:[#allocation2 + $0xe7] sm:$0x1]
  %v236 = vld [vmem:[#allocation2 + $0xff] sm:$0x1]
  %v237 = vld [vmem:[#allocation2 + $0x117] sm:$0x1]
  %v238 = vld [vmem:[#allocation2 + $0x12f] sm:$0x1]
  %v239 = vld [vmem:[#allocation2 + $0x147] sm:$0x1]
  %v240 = vld [vmem:[#allocation2 + $0x15f] sm:$0x1]
  %v241 = vld [vmem:[#allocation2 + $0x177] sm:$0x1]
  %v242 = vld [vmem:[#allocation2 + $0x18f] sm:$0x1]
  %v243 = vld [vmem:[#allocation2 + $0x1a7] sm:$0x1]
  %v244 = vld [vmem:[#allocation2 + $0x1bf] sm:$0x1]
  %v245 = vld [vmem:[#allocation2 + $0x1d7] sm:$0x1]
  %v246 = vld [vmem:[#allocation2 + $0x1ef] sm:$0x1]
  %v247 = vld [vmem:[#allocation2 + $0x207] sm:$0x1]
  %v248 = vld [vmem:[#allocation2 + $0x21f] sm:$0x1]
  %v249 = vld [vmem:[#allocation2 + $0x237] sm:$0x1]
  %v250 = vld [vmem:[#allocation2 + $0x24f] sm:$0x1]
  %v251 = vld [vmem:[#allocation2 + $0x267] sm:$0x1]
  %v252 = vld [vmem:[#allocation2 + $0x27f] sm:$0x1]
  %v253 = vld [vmem:[#allocation2 + $0x297] sm:$0x1]
  %v254 = vld [vmem:[#allocation2 + $0x2af] sm:$0x1]
  %v255 = vld [vmem:[#allocation2 + $0x2c7] sm:$0x1]
  %v256 = vld [vmem:[#allocation2 + $0x2df] sm:$0x1]
  %v257 = vld [vmem:[#allocation2 + $0x2f7] sm:$0x1]
  %v258 = vld [vmem:[#allocation2 + $0x30f] sm:$0x1]
  %v259 = vld [vmem:[#allocation2 + $0x327] sm:$0x1]
  %v260 = vld [vmem:[#allocation2 + $0x33f] sm:$0x1]
  %v261 = vld [vmem:[#allocation2 + $0x357] sm:$0x1]
  %262 = vst.msk [vmem:[#allocation2 + $0x11] sm:$0x1] %vm189, %v226
  %263 = vst.msk [vmem:[#allocation2 + $0x29] sm:$0x1] %vm189, %v227
  %264 = vst.msk [vmem:[#allocation2 + $0x41] sm:$0x1] %vm189, %v228
  %265 = vst.msk [vmem:[#allocation2 + $0x59] sm:$0x1] %vm189, %v229
  %266 = vst.msk [vmem:[#allocation2 + $0x71] sm:$0x1] %vm189, %v230
  %267 = vst.msk [vmem:[#allocation2 + $0x89] sm:$0x1] %vm189, %v231
  %268 = vst.msk [vmem:[#allocation2 + $0xa1] sm:$0x1] %vm189, %v232
  %269 = vst.msk [vmem:[#allocation2 + $0xb9] sm:$0x1] %vm189, %v233
  %270 = vst.msk [vmem:[#allocation2 + $0xd1] sm:$0x1] %vm189, %v234
  %271 = vst.msk [vmem:[#allocation2 + $0xe9] sm:$0x1] %vm189, %v235
  %272 = vst.msk [vmem:[#allocation2 + $0x101] sm:$0x1] %vm189, %v236
  %273 = vst.msk [vmem:[#allocation2 + $0x119] sm:$0x1] %vm189, %v237
  %274 = vst.msk [vmem:[#allocation2 + $0x131] sm:$0x1] %vm189, %v238
  %275 = vst.msk [vmem:[#allocation2 + $0x149] sm:$0x1] %vm189, %v239
  %276 = vst.msk [vmem:[#allocation2 + $0x161] sm:$0x1] %vm189, %v240
  %277 = vst.msk [vmem:[#allocation2 + $0x179] sm:$0x1] %vm189, %v241
  %278 = vst.msk [vmem:[#allocation2 + $0x191] sm:$0x1] %vm189, %v242
  %279 = vst.msk [vmem:[#allocation2 + $0x1a9] sm:$0x1] %vm189, %v243
  %280 = vst.msk [vmem:[#allocation2 + $0x1c1] sm:$0x1] %vm189, %v244
  %281 = vst.msk [vmem:[#allocation2 + $0x1d9] sm:$0x1] %vm189, %v245
  %282 = vst.msk [vmem:[#allocation2 + $0x1f1] sm:$0x1] %vm189, %v246
  %283 = vst.msk [vmem:[#allocation2 + $0x209] sm:$0x1] %vm189, %v247
  %284 = vst.msk [vmem:[#allocation2 + $0x221] sm:$0x1] %vm189, %v248
  %285 = vst.msk [vmem:[#allocation2 + $0x239] sm:$0x1] %vm189, %v249
  %286 = vst.msk [vmem:[#allocation2 + $0x251] sm:$0x1] %vm189, %v250
  %287 = vst.msk [vmem:[#allocation2 + $0x269] sm:$0x1] %vm189, %v251
  %288 = vst.msk [vmem:[#allocation2 + $0x281] sm:$0x1] %vm189, %v252
  %289 = vst.msk [vmem:[#allocation2 + $0x299] sm:$0x1] %vm189, %v253
  %290 = vst.msk [vmem:[#allocation2 + $0x2b1] sm:$0x1] %vm189, %v254
  %291 = vst.msk [vmem:[#allocation2 + $0x2c9] sm:$0x1] %vm189, %v255
  %292 = vst.msk [vmem:[#allocation2 + $0x2e1] sm:$0x1] %vm189, %v256
  %293 = vst.msk [vmem:[#allocation2 + $0x2f9] sm:$0x1] %vm189, %v257
  %294 = vst.msk [vmem:[#allocation2 + $0x311] sm:$0x1] %vm189, %v258
  %295 = vst.msk [vmem:[#allocation2 + $0x329] sm:$0x1] %vm189, %v259
  %296 = vst.msk [vmem:[#allocation2 + $0x341] sm:$0x1] %vm189, %v260
  %297 = vst.msk [vmem:[#allocation2 + $0x359] sm:$0x1] %vm189, %v261
  %v298 = vld [vmem:[#allocation2] sm:$0xff]
  %v299 = vld [vmem:[#allocation2 + $0x8] sm:$0xff]
  %v300 = vld [vmem:[#allocation2 + $0x18] sm:$0xff]
  %v301 = vld [vmem:[#allocation2 + $0x20] sm:$0xff]
  %v302 = vld [vmem:[#allocation2 + $0x30] sm:$0xff]
  %v303 = vld [vmem:[#allocation2 + $0x38] sm:$0xff]
  %v304 = vld [vmem:[#allocation2 + $0x48] sm:$0xff]
  %v305 = vld [vmem:[#allocation2 + $0x50] sm:$0xff]
  %v306 = vld [vmem:[#allocation2 + $0x60] sm:$0xff]
  %v307 = vld [vmem:[#allocation2 + $0x68] sm:$0xff]
  %v308 = vld [vmem:[#allocation2 + $0x78] sm:$0xff]
  %v309 = vld [vmem:[#allocation2 + $0x80] sm:$0xff]
  %v310 = vld [vmem:[#allocation2 + $0x90] sm:$0xff]
  %v311 = vld [vmem:[#allocation2 + $0x98] sm:$0xff]
  %v312 = vld [vmem:[#allocation2 + $0xa8] sm:$0xff]
  %v313 = vld [vmem:[#allocation2 + $0xb0] sm:$0xff]
  %v314 = vld [vmem:[#allocation2 + $0xc0] sm:$0xff]
  %v315 = vld [vmem:[#allocation2 + $0xc8] sm:$0xff]
  %v316 = vld [vmem:[#allocation2 + $0xd8] sm:$0xff]
  %v317 = vld [vmem:[#allocation2 + $0xe0] sm:$0xff]
  %v318 = vld [vmem:[#allocation2 + $0xf0] sm:$0xff]
  %v319 = vld [vmem:[#allocation2 + $0xf8] sm:$0xff]
  %v320 = vld [vmem:[#allocation2 + $0x108] sm:$0xff]
  %v321 = vld [vmem:[#allocation2 + $0x110] sm:$0xff]
  %v322 = vld [vmem:[#allocation2 + $0x120] sm:$0xff]
  %v323 = vld [vmem:[#allocation2 + $0x128] sm:$0xff]
  %v324 = vld [vmem:[#allocation2 + $0x138] sm:$0xff]
  %v325 = vld [vmem:[#allocation2 + $0x140] sm:$0xff]
  %v326 = vld [vmem:[#allocation2 + $0x150] sm:$0xff]
  %v327 = vld [vmem:[#allocation2 + $0x158] sm:$0xff]
  %v328 = vld [vmem:[#allocation2 + $0x168] sm:$0xff]
  %v329 = vld [vmem:[#allocation2 + $0x170] sm:$0xff]
  %v330 = vld [vmem:[#allocation2 + $0x1b0] sm:$0xff]
  %v331 = vld [vmem:[#allocation2 + $0x1b8] sm:$0xff]
  %v332 = vld [vmem:[#allocation2 + $0x1c8] sm:$0xff]
  %v333 = vld [vmem:[#allocation2 + $0x1d0] sm:$0xff]
  %v334 = vld [vmem:[#allocation2 + $0x1e0] sm:$0xff]
  %v335 = vld [vmem:[#allocation2 + $0x1e8] sm:$0xff]
  %v336 = vld [vmem:[#allocation2 + $0x1f8] sm:$0xff]
  %v337 = vld [vmem:[#allocation2 + $0x200] sm:$0xff]
  %v338 = vld [vmem:[#allocation2 + $0x210] sm:$0xff]
  %v339 = vld [vmem:[#allocation2 + $0x218] sm:$0xff]
  %v340 = vld [vmem:[#allocation2 + $0x228] sm:$0xff]
  %v341 = vld [vmem:[#allocation2 + $0x230] sm:$0xff]
  %v342 = vld [vmem:[#allocation2 + $0x240] sm:$0xff]
  %v343 = vld [vmem:[#allocation2 + $0x248] sm:$0xff]
  %v344 = vld [vmem:[#allocation2 + $0x258] sm:$0xff]
  %v345 = vld [vmem:[#allocation2 + $0x260] sm:$0xff]
  %v346 = vld [vmem:[#allocation2 + $0x270] sm:$0xff]
  %v347 = vld [vmem:[#allocation2 + $0x278] sm:$0xff]
  %v348 = vld [vmem:[#allocation2 + $0x288] sm:$0xff]
  %v349 = vld [vmem:[#allocation2 + $0x290] sm:$0xff]
  %v350 = vld [vmem:[#allocation2 + $0x2a0] sm:$0xff]
  %v351 = vld [vmem:[#allocation2 + $0x2a8] sm:$0xff]
  %v352 = vld [vmem:[#allocation2 + $0x2b8] sm:$0xff]
  %v353 = vld [vmem:[#allocation2 + $0x2c0] sm:$0xff]
  %v354 = vld [vmem:[#allocation2 + $0x2d0] sm:$0xff]
  %v355 = vld [vmem:[#allocation2 + $0x2d8] sm:$0xff]
  %v356 = vld [vmem:[#allocation2 + $0x2e8] sm:$0xff]
  %v357 = vld [vmem:[#allocation2 + $0x2f0] sm:$0xff]
  %v358 = vld [vmem:[#allocation2 + $0x300] sm:$0xff]
  %v359 = vld [vmem:[#allocation2 + $0x308] sm:$0xff]
  %v360 = vld [vmem:[#allocation2 + $0x318] sm:$0xff]
  %v361 = vld [vmem:[#allocation2 + $0x320] sm:$0xff]
  %v362 = vld [vmem:[%s1] sm:$0xf]
  %v363 = vld [vmem:[#allocation2 + $0x1] sm:$0xff]
  %v364 = vld [vmem:[#allocation2 + $0x9] sm:$0xff]
  %v365 = vld [vmem:[#allocation2 + $0x19] sm:$0xff]
  %v366 = vld [vmem:[#allocation2 + $0x21] sm:$0xff]
  %v367 = vld [vmem:[#allocation2 + $0x31] sm:$0xff]
  %v368 = vld [vmem:[#allocation2 + $0x39] sm:$0xff]
  %v369 = vld [vmem:[#allocation2 + $0x49] sm:$0xff]
  %v370 = vld [vmem:[#allocation2 + $0x51] sm:$0xff]
  %v371 = vld [vmem:[#allocation2 + $0x61] sm:$0xff]
  %v372 = vld [vmem:[#allocation2 + $0x69] sm:$0xff]
  %v373 = vld [vmem:[#allocation2 + $0x79] sm:$0xff]
  %v374 = vld [vmem:[#allocation2 + $0x81] sm:$0xff]
  %v375 = vld [vmem:[#allocation2 + $0x91] sm:$0xff]
  %v376 = vld [vmem:[#allocation2 + $0x99] sm:$0xff]
  %v377 = vld [vmem:[#allocation2 + $0xa9] sm:$0xff]
  %v378 = vld [vmem:[#allocation2 + $0xb1] sm:$0xff]
  %v379 = vld [vmem:[#allocation2 + $0xc1] sm:$0xff]
  %v380 = vld [vmem:[#allocation2 + $0xc9] sm:$0xff]
  %v381 = vld [vmem:[#allocation2 + $0xd9] sm:$0xff]
  %v382 = vld [vmem:[#allocation2 + $0xe1] sm:$0xff]
  %v383 = vld [vmem:[#allocation2 + $0xf1] sm:$0xff]
  %v384 = vld [vmem:[#allocation2 + $0xf9] sm:$0xff]
  %v385 = vld [vmem:[#allocation2 + $0x109] sm:$0xff]
  %v386 = vld [vmem:[#allocation2 + $0x111] sm:$0xff]
  %v387 = vld [vmem:[#allocation2 + $0x121] sm:$0xff]
  %v388 = vld [vmem:[#allocation2 + $0x129] sm:$0xff]
  %v389 = vld [vmem:[#allocation2 + $0x139] sm:$0xff]
  %v390 = vld [vmem:[#allocation2 + $0x141] sm:$0xff]
  %v391 = vld [vmem:[#allocation2 + $0x151] sm:$0xff]
  %v392 = vld [vmem:[#allocation2 + $0x159] sm:$0xff]
  %v393 = vld [vmem:[#allocation2 + $0x169] sm:$0xff]
  %v394 = vld [vmem:[#allocation2 + $0x171] sm:$0xff]
  %v395 = vld [vmem:[#allocation2 + $0x1b1] sm:$0xff]
  %v396 = vld [vmem:[#allocation2 + $0x1b9] sm:$0xff]
  %v397 = vld [vmem:[#allocation2 + $0x1c9] sm:$0xff]
  %v398 = vld [vmem:[#allocation2 + $0x1d1] sm:$0xff]
  %v399 = vld [vmem:[#allocation2 + $0x1e1] sm:$0xff]
  %v400 = vld [vmem:[#allocation2 + $0x1e9] sm:$0xff]
  %v401 = vld [vmem:[#allocation2 + $0x1f9] sm:$0xff]
  %v402 = vld [vmem:[#allocation2 + $0x201] sm:$0xff]
  %v403 = vld [vmem:[#allocation2 + $0x211] sm:$0xff]
  %v404 = vld [vmem:[#allocation2 + $0x219] sm:$0xff]
  %v405 = vld [vmem:[#allocation2 + $0x229] sm:$0xff]
  %v406 = vld [vmem:[#allocation2 + $0x231] sm:$0xff]
  %v407 = vld [vmem:[#allocation2 + $0x241] sm:$0xff]
  %v408 = vld [vmem:[#allocation2 + $0x249] sm:$0xff]
  %v409 = vld [vmem:[#allocation2 + $0x259] sm:$0xff]
  %v410 = vld [vmem:[#allocation2 + $0x261] sm:$0xff]
  %v411 = vld [vmem:[#allocation2 + $0x271] sm:$0xff]
  %v412 = vld [vmem:[#allocation2 + $0x279] sm:$0xff]
  %v413 = vld [vmem:[#allocation2 + $0x289] sm:$0xff]
  %v414 = vld [vmem:[#allocation2 + $0x291] sm:$0xff]
  %v415 = vld [vmem:[#allocation2 + $0x2a1] sm:$0xff]
  %v416 = vld [vmem:[#allocation2 + $0x2a9] sm:$0xff]
  %v417 = vld [vmem:[#allocation2 + $0x2b9] sm:$0xff]
  %v418 = vld [vmem:[#allocation2 + $0x2c1] sm:$0xff]
  %v419 = vld [vmem:[#allocation2 + $0x2d1] sm:$0xff]
  %v420 = vld [vmem:[#allocation2 + $0x2d9] sm:$0xff]
  %v421 = vld [vmem:[#allocation2 + $0x2e9] sm:$0xff]
  %v422 = vld [vmem:[#allocation2 + $0x2f1] sm:$0xff]
  %v423 = vld [vmem:[#allocation2 + $0x301] sm:$0xff]
  %v424 = vld [vmem:[#allocation2 + $0x309] sm:$0xff]
  %v425 = vld [vmem:[#allocation2 + $0x319] sm:$0xff]
  %v426 = vld [vmem:[#allocation2 + $0x321] sm:$0xff]
  %s427 = scalar_lea.vmem %s1, 4
  %v428 = vld [vmem:[%s427] sm:$0xf]
  %v430 = vsel %vm79, %v363, 0
  %v433 = vsel %vm79, %v364, 0
  %v436 = vsel %vm79, %v365, 0
  %v439 = vsel %vm79, %v366, 0
  %v442 = vsel %vm79, %v367, 0
  %v445 = vsel %vm79, %v368, 0
  %v448 = vsel %vm79, %v369, 0
  %v451 = vsel %vm79, %v370, 0
  %v454 = vsel %vm79, %v371, 0
  %v457 = vsel %vm79, %v372, 0
  %v460 = vsel %vm79, %v373, 0
  %v463 = vsel %vm79, %v374, 0
  %v466 = vsel %vm79, %v375, 0
  %v469 = vsel %vm79, %v376, 0
  %v472 = vsel %vm79, %v377, 0
  %v475 = vsel %vm79, %v378, 0
  %v478 = vsel %vm79, %v379, 0
  %v481 = vsel %vm79, %v380, 0
  %v484 = vsel %vm79, %v381, 0
  %v487 = vsel %vm79, %v382, 0
  %v490 = vsel %vm79, %v383, 0
  %v493 = vsel %vm79, %v384, 0
  %v496 = vsel %vm79, %v385, 0
  %v499 = vsel %vm79, %v386, 0
  %v502 = vsel %vm79, %v387, 0
  %v505 = vsel %vm79, %v388, 0
  %v508 = vsel %vm79, %v389, 0
  %v511 = vsel %vm79, %v390, 0
  %v514 = vsel %vm79, %v391, 0
  %v517 = vsel %vm79, %v392, 0
  %v520 = vsel %vm79, %v393, 0
  %v523 = vsel %vm79, %v394, 0
  %v526 = vsel %vm79, %v395, 0
  %v529 = vsel %vm79, %v396, 0
  %v532 = vsel %vm79, %v397, 0
  %v535 = vsel %vm79, %v398, 0
  %v538 = vsel %vm79, %v399, 0
  %v541 = vsel %vm79, %v400, 0
  %v544 = vsel %vm79, %v401, 0
  %v547 = vsel %vm79, %v402, 0
  %v550 = vsel %vm79, %v403, 0
  %v553 = vsel %vm79, %v404, 0
  %v556 = vsel %vm79, %v405, 0
  %v559 = vsel %vm79, %v406, 0
  %v562 = vsel %vm79, %v407, 0
  %v565 = vsel %vm79, %v408, 0
  %v568 = vsel %vm79, %v409, 0
  %v571 = vsel %vm79, %v410, 0
  %v574 = vsel %vm79, %v411, 0
  %v577 = vsel %vm79, %v412, 0
  %v580 = vsel %vm79, %v413, 0
  %v583 = vsel %vm79, %v414, 0
  %v586 = vsel %vm79, %v415, 0
  %v589 = vsel %vm79, %v416, 0
  %v592 = vsel %vm79, %v417, 0
  %v595 = vsel %vm79, %v418, 0
  %v598 = vsel %vm79, %v419, 0
  %v601 = vsel %vm79, %v420, 0
  %v604 = vsel %vm79, %v421, 0
  %v607 = vsel %vm79, %v422, 0
  %v610 = vsel %vm79, %v423, 0
  %v613 = vsel %vm79, %v424, 0
  %v616 = vsel %vm79, %v425, 0
  %v619 = vsel %vm79, %v426, 0
  %vm621 = vcmask 1043456
  %v623 = vsel %vm621, %v428, 0
  %625 = vmatprep.subr.mxu0 0.0
  %626 = vmatpush1.msra.mxu0 0.0
  %627 = vmatprep.subr.mxu0 0.0
  %628 = vmatpush1.msra.mxu0 0.0
  %629 = vmatprep.subr.mxu0 0.0
  %630 = vmatpush1.msra.mxu0 0.0
  %631 = vmatprep.subr.mxu0 0.0
  %632 = vmatpush1.msra.mxu0 0.0
  %633 = vmatprep.subr.mxu0 0.0
  %634 = vmatpush1.msra.mxu0 0.0
  %635 = vmatprep.subr.mxu0 0.0
  %636 = vmatpush1.msra.mxu0 0.0
  %637 = vmatprep.subr.mxu0 0.0
  %638 = vmatpush1.msra.mxu0 0.0
  %639 = vmatprep.subr.mxu0 0.0
  %640 = vmatpush1.msra.mxu0 0.0
  %641 = vmatprep.subr.mxu0 0.0
  %642 = vmatpush1.msra.mxu0 0.0
  %643 = vmatprep.subr.mxu0 0.0
  %644 = vmatpush1.msra.mxu0 0.0
  %645 = vmatprep.subr.mxu0 0.0
  %646 = vmatpush1.msra.mxu0 0.0
  %647 = vmatprep.subr.mxu0 0.0
  %648 = vmatpush1.msra.mxu0 0.0
  %649 = vmatprep.subr.mxu0 0.0
  %650 = vmatpush1.msra.mxu0 0.0
  %651 = vmatprep.subr.mxu0 0.0
  %652 = vmatpush1.msra.mxu0 0.0
  %653 = vmatprep.subr.mxu0 0.0
  %654 = vmatpush1.msra.mxu0 0.0
  %655 = vmatprep.subr.mxu0 0.0
  %656 = vmatpush1.msra.mxu0 %v623
  %657 = vmatprep.subr.mxu0 0.0
  %658 = vmatpush2.msra.mxu0 0.0
  %659 = vmatprep.subr.mxu0 0.0
  %660 = vmatpush2.msra.mxu0 0.0
  %661 = vmatprep.subr.mxu0 0.0
  %662 = vmatpush2.msra.mxu0 0.0
  %663 = vmatprep.subr.mxu0 0.0
  %664 = vmatpush2.msra.mxu0 0.0
  %665 = vmatprep.subr.mxu0 0.0
  %666 = vmatpush2.msra.mxu0 0.0
  %667 = vmatprep.subr.mxu0 0.0
  %668 = vmatpush2.msra.mxu0 0.0
  %669 = vmatprep.subr.mxu0 0.0
  %670 = vmatpush2.msra.mxu0 0.0
  %671 = vmatprep.subr.mxu0 0.0
  %672 = vmatpush2.msra.mxu0 0.0
  %673 = vmatprep.subr.mxu0 0.0
  %674 = vmatpush2.msra.mxu0 0.0
  %675 = vmatprep.subr.mxu0 0.0
  %676 = vmatpush2.msra.mxu0 0.0
  %677 = vmatprep.subr.mxu0 0.0
  %678 = vmatpush2.msra.mxu0 0.0
  %679 = vmatprep.subr.mxu0 0.0
  %680 = vmatpush2.msra.mxu0 0.0
  %681 = vmatprep.subr.mxu0 0.0
  %682 = vmatpush2.msra.mxu0 0.0
  %683 = vmatprep.subr.mxu0 0.0
  %684 = vmatpush2.msra.mxu0 0.0
  %685 = vmatprep.subr.mxu0 0.0
  %686 = vmatpush2.msra.mxu0 0.0
  %687 = vmatprep.subr.mxu0 0.0
  %688 = vmatpush2.msra.mxu0 0.0
  %689 = vmatprep.mubr.f32.mxu0 0.0
  %690 = vmatmul.mubr.f32.gmra.mxu0 %v430
  %v691 = vpop.f32.mrf.mxu0
  %v692 = vadd.f32 0.0, %v691
  %v693 = vpop.f32.mrf.mxu0
  %694 = vmatprep.mubr.f32.mxu0 0.0
  %695 = vmatmul.mubr.f32.gmra.mxu0 %v433
  %v696 = vpop.f32.mrf.mxu0
  %v697 = vadd.f32 0.0, %v696
  %v698 = vpop.f32.mrf.mxu0
  %699 = vmatprep.mubr.f32.mxu0 0.0
  %700 = vmatmul.mubr.f32.gmra.mxu0 %v436
  %v701 = vpop.f32.mrf.mxu0
  %v702 = vadd.f32 0.0, %v701
  %v703 = vpop.f32.mrf.mxu0
  %704 = vmatprep.mubr.f32.mxu0 0.0
  %705 = vmatmul.mubr.f32.gmra.mxu0 %v439
  %v706 = vpop.f32.mrf.mxu0
  %v707 = vadd.f32 0.0, %v706
  %v708 = vpop.f32.mrf.mxu0
  %709 = vmatprep.mubr.f32.mxu0 0.0
  %710 = vmatmul.mubr.f32.gmra.mxu0 %v442
  %v711 = vpop.f32.mrf.mxu0
  %v712 = vadd.f32 0.0, %v711
  %v713 = vpop.f32.mrf.mxu0
  %714 = vmatprep.mubr.f32.mxu0 0.0
  %715 = vmatmul.mubr.f32.gmra.mxu0 %v445
  %v716 = vpop.f32.mrf.mxu0
  %v717 = vadd.f32 0.0, %v716
  %v718 = vpop.f32.mrf.mxu0
  %719 = vmatprep.mubr.f32.mxu0 0.0
  %720 = vmatmul.mubr.f32.gmra.mxu0 %v448
  %v721 = vpop.f32.mrf.mxu0
  %v722 = vadd.f32 0.0, %v721
  %v723 = vpop.f32.mrf.mxu0
  %724 = vmatprep.mubr.f32.mxu0 0.0
  %725 = vmatmul.mubr.f32.gmra.mxu0 %v451
  %v726 = vpop.f32.mrf.mxu0
  %v727 = vadd.f32 0.0, %v726
  %v728 = vpop.f32.mrf.mxu0
  %729 = vmatprep.mubr.f32.mxu0 0.0
  %730 = vmatmul.mubr.f32.gmra.mxu0 %v454
  %v731 = vpop.f32.mrf.mxu0
  %v732 = vadd.f32 0.0, %v731
  %v733 = vpop.f32.mrf.mxu0
  %734 = vmatprep.mubr.f32.mxu0 0.0
  %735 = vmatmul.mubr.f32.gmra.mxu0 %v457
  %v736 = vpop.f32.mrf.mxu0
  %v737 = vadd.f32 0.0, %v736
  %v738 = vpop.f32.mrf.mxu0
  %739 = vmatprep.mubr.f32.mxu0 0.0
  %740 = vmatmul.mubr.f32.gmra.mxu0 %v460
  %v741 = vpop.f32.mrf.mxu0
  %v742 = vadd.f32 0.0, %v741
  %v743 = vpop.f32.mrf.mxu0
  %744 = vmatprep.mubr.f32.mxu0 0.0
  %745 = vmatmul.mubr.f32.gmra.mxu0 %v463
  %v746 = vpop.f32.mrf.mxu0
  %v747 = vadd.f32 0.0, %v746
  %v748 = vpop.f32.mrf.mxu0
  %749 = vmatprep.mubr.f32.mxu0 0.0
  %750 = vmatmul.mubr.f32.gmra.mxu0 %v466
  %v751 = vpop.f32.mrf.mxu0
  %v752 = vadd.f32 0.0, %v751
  %v753 = vpop.f32.mrf.mxu0
  %754 = vmatprep.mubr.f32.mxu0 0.0
  %755 = vmatmul.mubr.f32.gmra.mxu0 %v469
  %v756 = vpop.f32.mrf.mxu0
  %v757 = vadd.f32 0.0, %v756
  %v758 = vpop.f32.mrf.mxu0
  %759 = vmatprep.mubr.f32.mxu0 0.0
  %760 = vmatmul.mubr.f32.gmra.mxu0 %v472
  %v761 = vpop.f32.mrf.mxu0
  %v762 = vadd.f32 0.0, %v761
  %v763 = vpop.f32.mrf.mxu0
  %764 = vmatprep.mubr.f32.mxu0 0.0
  %765 = vmatmul.mubr.f32.gmra.mxu0 %v475
  %v766 = vpop.f32.mrf.mxu0
  %v767 = vadd.f32 0.0, %v766
  %v768 = vpop.f32.mrf.mxu0
  %769 = vmatprep.mubr.f32.mxu0 0.0
  %770 = vmatmul.mubr.f32.gmra.mxu0 %v478
  %v771 = vpop.f32.mrf.mxu0
  %v772 = vadd.f32 0.0, %v771
  %v773 = vpop.f32.mrf.mxu0
  %774 = vmatprep.mubr.f32.mxu0 0.0
  %775 = vmatmul.mubr.f32.gmra.mxu0 %v481
  %v776 = vpop.f32.mrf.mxu0
  %v777 = vadd.f32 0.0, %v776
  %v778 = vpop.f32.mrf.mxu0
  %779 = vmatprep.mubr.f32.mxu0 0.0
  %780 = vmatmul.mubr.f32.gmra.mxu0 %v484
  %v781 = vpop.f32.mrf.mxu0
  %v782 = vadd.f32 0.0, %v781
  %v783 = vpop.f32.mrf.mxu0
  %784 = vmatprep.mubr.f32.mxu0 0.0
  %785 = vmatmul.mubr.f32.gmra.mxu0 %v487
  %v786 = vpop.f32.mrf.mxu0
  %v787 = vadd.f32 0.0, %v786
  %v788 = vpop.f32.mrf.mxu0
  %789 = vmatprep.mubr.f32.mxu0 0.0
  %790 = vmatmul.mubr.f32.gmra.mxu0 %v490
  %v791 = vpop.f32.mrf.mxu0
  %v792 = vadd.f32 0.0, %v791
  %v793 = vpop.f32.mrf.mxu0
  %794 = vmatprep.mubr.f32.mxu0 0.0
  %795 = vmatmul.mubr.f32.gmra.mxu0 %v493
  %v796 = vpop.f32.mrf.mxu0
  %v797 = vadd.f32 0.0, %v796
  %v798 = vpop.f32.mrf.mxu0
  %799 = vmatprep.mubr.f32.mxu0 0.0
  %800 = vmatmul.mubr.f32.gmra.mxu0 %v496
  %v801 = vpop.f32.mrf.mxu0
  %v802 = vadd.f32 0.0, %v801
  %v803 = vpop.f32.mrf.mxu0
  %804 = vmatprep.mubr.f32.mxu0 0.0
  %805 = vmatmul.mubr.f32.gmra.mxu0 %v499
  %v806 = vpop.f32.mrf.mxu0
  %v807 = vadd.f32 0.0, %v806
  %v808 = vpop.f32.mrf.mxu0
  %809 = vmatprep.mubr.f32.mxu0 0.0
  %810 = vmatmul.mubr.f32.gmra.mxu0 %v502
  %v811 = vpop.f32.mrf.mxu0
  %v812 = vadd.f32 0.0, %v811
  %v813 = vpop.f32.mrf.mxu0
  %814 = vmatprep.mubr.f32.mxu0 0.0
  %815 = vmatmul.mubr.f32.gmra.mxu0 %v505
  %v816 = vpop.f32.mrf.mxu0
  %v817 = vadd.f32 0.0, %v816
  %v818 = vpop.f32.mrf.mxu0
  %819 = vmatprep.mubr.f32.mxu0 0.0
  %820 = vmatmul.mubr.f32.gmra.mxu0 %v508
  %v821 = vpop.f32.mrf.mxu0
  %v822 = vadd.f32 0.0, %v821
  %v823 = vpop.f32.mrf.mxu0
  %824 = vmatprep.mubr.f32.mxu0 0.0
  %825 = vmatmul.mubr.f32.gmra.mxu0 %v511
  %v826 = vpop.f32.mrf.mxu0
  %v827 = vadd.f32 0.0, %v826
  %v828 = vpop.f32.mrf.mxu0
  %829 = vmatprep.mubr.f32.mxu0 0.0
  %830 = vmatmul.mubr.f32.gmra.mxu0 %v514
  %v831 = vpop.f32.mrf.mxu0
  %v832 = vadd.f32 0.0, %v831
  %v833 = vpop.f32.mrf.mxu0
  %834 = vmatprep.mubr.f32.mxu0 0.0
  %835 = vmatmul.mubr.f32.gmra.mxu0 %v517
  %v836 = vpop.f32.mrf.mxu0
  %v837 = vadd.f32 0.0, %v836
  %v838 = vpop.f32.mrf.mxu0
  %839 = vmatprep.mubr.f32.mxu0 0.0
  %840 = vmatmul.mubr.f32.gmra.mxu0 %v520
  %v841 = vpop.f32.mrf.mxu0
  %v842 = vadd.f32 0.0, %v841
  %v843 = vpop.f32.mrf.mxu0
  %844 = vmatprep.mubr.f32.mxu0 0.0
  %845 = vmatmul.mubr.f32.gmra.mxu0 %v523
  %v846 = vpop.f32.mrf.mxu0
  %v847 = vadd.f32 0.0, %v846
  %v848 = vpop.f32.mrf.mxu0
  %849 = vmatprep.mubr.f32.mxu0 0.0
  %850 = vmatmul.mubr.f32.gmra.mxu0 %v526
  %v851 = vpop.f32.mrf.mxu0
  %v852 = vadd.f32 0.0, %v851
  %v853 = vpop.f32.mrf.mxu0
  %854 = vmatprep.mubr.f32.mxu0 0.0
  %855 = vmatmul.mubr.f32.gmra.mxu0 %v529
  %v856 = vpop.f32.mrf.mxu0
  %v857 = vadd.f32 0.0, %v856
  %v858 = vpop.f32.mrf.mxu0
  %859 = vmatprep.mubr.f32.mxu0 0.0
  %860 = vmatmul.mubr.f32.gmra.mxu0 %v532
  %v861 = vpop.f32.mrf.mxu0
  %v862 = vadd.f32 0.0, %v861
  %v863 = vpop.f32.mrf.mxu0
  %864 = vmatprep.mubr.f32.mxu0 0.0
  %865 = vmatmul.mubr.f32.gmra.mxu0 %v535
  %v866 = vpop.f32.mrf.mxu0
  %v867 = vadd.f32 0.0, %v866
  %v868 = vpop.f32.mrf.mxu0
  %869 = vmatprep.mubr.f32.mxu0 0.0
  %870 = vmatmul.mubr.f32.gmra.mxu0 %v538
  %v871 = vpop.f32.mrf.mxu0
  %v872 = vadd.f32 0.0, %v871
  %v873 = vpop.f32.mrf.mxu0
  %874 = vmatprep.mubr.f32.mxu0 0.0
  %875 = vmatmul.mubr.f32.gmra.mxu0 %v541
  %v876 = vpop.f32.mrf.mxu0
  %v877 = vadd.f32 0.0, %v876
  %v878 = vpop.f32.mrf.mxu0
  %879 = vmatprep.mubr.f32.mxu0 0.0
  %880 = vmatmul.mubr.f32.gmra.mxu0 %v544
  %v881 = vpop.f32.mrf.mxu0
  %v882 = vadd.f32 0.0, %v881
  %v883 = vpop.f32.mrf.mxu0
  %884 = vmatprep.mubr.f32.mxu0 0.0
  %885 = vmatmul.mubr.f32.gmra.mxu0 %v547
  %v886 = vpop.f32.mrf.mxu0
  %v887 = vadd.f32 0.0, %v886
  %v888 = vpop.f32.mrf.mxu0
  %889 = vmatprep.mubr.f32.mxu0 0.0
  %890 = vmatmul.mubr.f32.gmra.mxu0 %v550
  %v891 = vpop.f32.mrf.mxu0
  %v892 = vadd.f32 0.0, %v891
  %v893 = vpop.f32.mrf.mxu0
  %894 = vmatprep.mubr.f32.mxu0 0.0
  %895 = vmatmul.mubr.f32.gmra.mxu0 %v553
  %v896 = vpop.f32.mrf.mxu0
  %v897 = vadd.f32 0.0, %v896
  %v898 = vpop.f32.mrf.mxu0
  %899 = vmatprep.mubr.f32.mxu0 0.0
  %900 = vmatmul.mubr.f32.gmra.mxu0 %v556
  %v901 = vpop.f32.mrf.mxu0
  %v902 = vadd.f32 0.0, %v901
  %v903 = vpop.f32.mrf.mxu0
  %904 = vmatprep.mubr.f32.mxu0 0.0
  %905 = vmatmul.mubr.f32.gmra.mxu0 %v559
  %v906 = vpop.f32.mrf.mxu0
  %v907 = vadd.f32 0.0, %v906
  %v908 = vpop.f32.mrf.mxu0
  %909 = vmatprep.mubr.f32.mxu0 0.0
  %910 = vmatmul.mubr.f32.gmra.mxu0 %v562
  %v911 = vpop.f32.mrf.mxu0
  %v912 = vadd.f32 0.0, %v911
  %v913 = vpop.f32.mrf.mxu0
  %914 = vmatprep.mubr.f32.mxu0 0.0
  %915 = vmatmul.mubr.f32.gmra.mxu0 %v565
  %v916 = vpop.f32.mrf.mxu0
  %v917 = vadd.f32 0.0, %v916
  %v918 = vpop.f32.mrf.mxu0
  %919 = vmatprep.mubr.f32.mxu0 0.0
  %920 = vmatmul.mubr.f32.gmra.mxu0 %v568
  %v921 = vpop.f32.mrf.mxu0
  %v922 = vadd.f32 0.0, %v921
  %v923 = vpop.f32.mrf.mxu0
  %924 = vmatprep.mubr.f32.mxu0 0.0
  %925 = vmatmul.mubr.f32.gmra.mxu0 %v571
  %v926 = vpop.f32.mrf.mxu0
  %v927 = vadd.f32 0.0, %v926
  %v928 = vpop.f32.mrf.mxu0
  %929 = vmatprep.mubr.f32.mxu0 0.0
  %930 = vmatmul.mubr.f32.gmra.mxu0 %v574
  %v931 = vpop.f32.mrf.mxu0
  %v932 = vadd.f32 0.0, %v931
  %v933 = vpop.f32.mrf.mxu0
  %934 = vmatprep.mubr.f32.mxu0 0.0
  %935 = vmatmul.mubr.f32.gmra.mxu0 %v577
  %v936 = vpop.f32.mrf.mxu0
  %v937 = vadd.f32 0.0, %v936
  %v938 = vpop.f32.mrf.mxu0
  %939 = vmatprep.mubr.f32.mxu0 0.0
  %940 = vmatmul.mubr.f32.gmra.mxu0 %v580
  %v941 = vpop.f32.mrf.mxu0
  %v942 = vadd.f32 0.0, %v941
  %v943 = vpop.f32.mrf.mxu0
  %944 = vmatprep.mubr.f32.mxu0 0.0
  %945 = vmatmul.mubr.f32.gmra.mxu0 %v583
  %v946 = vpop.f32.mrf.mxu0
  %v947 = vadd.f32 0.0, %v946
  %v948 = vpop.f32.mrf.mxu0
  %949 = vmatprep.mubr.f32.mxu0 0.0
  %950 = vmatmul.mubr.f32.gmra.mxu0 %v586
  %v951 = vpop.f32.mrf.mxu0
  %v952 = vadd.f32 0.0, %v951
  %v953 = vpop.f32.mrf.mxu0
  %954 = vmatprep.mubr.f32.mxu0 0.0
  %955 = vmatmul.mubr.f32.gmra.mxu0 %v589
  %v956 = vpop.f32.mrf.mxu0
  %v957 = vadd.f32 0.0, %v956
  %v958 = vpop.f32.mrf.mxu0
  %959 = vmatprep.mubr.f32.mxu0 0.0
  %960 = vmatmul.mubr.f32.gmra.mxu0 %v592
  %v961 = vpop.f32.mrf.mxu0
  %v962 = vadd.f32 0.0, %v961
  %v963 = vpop.f32.mrf.mxu0
  %964 = vmatprep.mubr.f32.mxu0 0.0
  %965 = vmatmul.mubr.f32.gmra.mxu0 %v595
  %v966 = vpop.f32.mrf.mxu0
  %v967 = vadd.f32 0.0, %v966
  %v968 = vpop.f32.mrf.mxu0
  %969 = vmatprep.mubr.f32.mxu0 0.0
  %970 = vmatmul.mubr.f32.gmra.mxu0 %v598
  %v971 = vpop.f32.mrf.mxu0
  %v972 = vadd.f32 0.0, %v971
  %v973 = vpop.f32.mrf.mxu0
  %974 = vmatprep.mubr.f32.mxu0 0.0
  %975 = vmatmul.mubr.f32.gmra.mxu0 %v601
  %v976 = vpop.f32.mrf.mxu0
  %v977 = vadd.f32 0.0, %v976
  %v978 = vpop.f32.mrf.mxu0
  %979 = vmatprep.mubr.f32.mxu0 0.0
  %980 = vmatmul.mubr.f32.gmra.mxu0 %v604
  %v981 = vpop.f32.mrf.mxu0
  %v982 = vadd.f32 0.0, %v981
  %v983 = vpop.f32.mrf.mxu0
  %984 = vmatprep.mubr.f32.mxu0 0.0
  %985 = vmatmul.mubr.f32.gmra.mxu0 %v607
  %v986 = vpop.f32.mrf.mxu0
  %v987 = vadd.f32 0.0, %v986
  %v988 = vpop.f32.mrf.mxu0
  %989 = vmatprep.mubr.f32.mxu0 0.0
  %990 = vmatmul.mubr.f32.gmra.mxu0 %v610
  %v991 = vpop.f32.mrf.mxu0
  %v992 = vadd.f32 0.0, %v991
  %v993 = vpop.f32.mrf.mxu0
  %994 = vmatprep.mubr.f32.mxu0 0.0
  %995 = vmatmul.mubr.f32.gmra.mxu0 %v613
  %v996 = vpop.f32.mrf.mxu0
  %v997 = vadd.f32 0.0, %v996
  %v998 = vpop.f32.mrf.mxu0
  %999 = vmatprep.mubr.f32.mxu0 0.0
  %1000 = vmatmul.mubr.f32.gmra.mxu0 %v616
  %v1001 = vpop.f32.mrf.mxu0
  %v1002 = vadd.f32 0.0, %v1001
  %v1003 = vpop.f32.mrf.mxu0
  %1004 = vmatprep.mubr.f32.mxu0 0.0
  %1005 = vmatmul.mubr.f32.gmra.mxu0 %v619
  %v1006 = vpop.f32.mrf.mxu0
  %v1007 = vadd.f32 0.0, %v1006
  %v1008 = vpop.f32.mrf.mxu0
  %1009 = vdwg.mxu0
  %v1011 = vsel %vm79, %v298, 0
  %v1014 = vsel %vm79, %v299, 0
  %v1017 = vsel %vm79, %v300, 0
  %v1020 = vsel %vm79, %v301, 0
  %v1023 = vsel %vm79, %v302, 0
  %v1026 = vsel %vm79, %v303, 0
  %v1029 = vsel %vm79, %v304, 0
  %v1032 = vsel %vm79, %v305, 0
  %v1035 = vsel %vm79, %v306, 0
  %v1038 = vsel %vm79, %v307, 0
  %v1041 = vsel %vm79, %v308, 0
  %v1044 = vsel %vm79, %v309, 0
  %v1047 = vsel %vm79, %v310, 0
  %v1050 = vsel %vm79, %v311, 0
  %v1053 = vsel %vm79, %v312, 0
  %v1056 = vsel %vm79, %v313, 0
  %v1059 = vsel %vm79, %v314, 0
  %v1062 = vsel %vm79, %v315, 0
  %v1065 = vsel %vm79, %v316, 0
  %v1068 = vsel %vm79, %v317, 0
  %v1071 = vsel %vm79, %v318, 0
  %v1074 = vsel %vm79, %v319, 0
  %v1077 = vsel %vm79, %v320, 0
  %v1080 = vsel %vm79, %v321, 0
  %v1083 = vsel %vm79, %v322, 0
  %v1086 = vsel %vm79, %v323, 0
  %v1089 = vsel %vm79, %v324, 0
  %v1092 = vsel %vm79, %v325, 0
  %v1095 = vsel %vm79, %v326, 0
  %v1098 = vsel %vm79, %v327, 0
  %v1101 = vsel %vm79, %v328, 0
  %v1104 = vsel %vm79, %v329, 0
  %v1107 = vsel %vm79, %v330, 0
  %v1110 = vsel %vm79, %v331, 0
  %v1113 = vsel %vm79, %v332, 0
  %v1116 = vsel %vm79, %v333, 0
  %v1119 = vsel %vm79, %v334, 0
  %v1122 = vsel %vm79, %v335, 0
  %v1125 = vsel %vm79, %v336, 0
  %v1128 = vsel %vm79, %v337, 0
  %v1131 = vsel %vm79, %v338, 0
  %v1134 = vsel %vm79, %v339, 0
  %v1137 = vsel %vm79, %v340, 0
  %v1140 = vsel %vm79, %v341, 0
  %v1143 = vsel %vm79, %v342, 0
  %v1146 = vsel %vm79, %v343, 0
  %v1149 = vsel %vm79, %v344, 0
  %v1152 = vsel %vm79, %v345, 0
  %v1155 = vsel %vm79, %v346, 0
  %v1158 = vsel %vm79, %v347, 0
  %v1161 = vsel %vm79, %v348, 0
  %v1164 = vsel %vm79, %v349, 0
  %v1167 = vsel %vm79, %v350, 0
  %v1170 = vsel %vm79, %v351, 0
  %v1173 = vsel %vm79, %v352, 0
  %v1176 = vsel %vm79, %v353, 0
  %v1179 = vsel %vm79, %v354, 0
  %v1182 = vsel %vm79, %v355, 0
  %v1185 = vsel %vm79, %v356, 0
  %v1188 = vsel %vm79, %v357, 0
  %v1191 = vsel %vm79, %v358, 0
  %v1194 = vsel %vm79, %v359, 0
  %v1197 = vsel %vm79, %v360, 0
  %v1200 = vsel %vm79, %v361, 0
  %v1203 = vsel %vm621, %v362, 0
  %1205 = vmatprep.subr.mxu0 0.0
  %1206 = vmatpush1.msra.mxu0 0.0
  %1207 = vmatprep.subr.mxu0 0.0
  %1208 = vmatpush1.msra.mxu0 0.0
  %1209 = vmatprep.subr.mxu0 0.0
  %1210 = vmatpush1.msra.mxu0 0.0
  %1211 = vmatprep.subr.mxu0 0.0
  %1212 = vmatpush1.msra.mxu0 0.0
  %1213 = vmatprep.subr.mxu0 0.0
  %1214 = vmatpush1.msra.mxu0 0.0
  %1215 = vmatprep.subr.mxu0 0.0
  %1216 = vmatpush1.msra.mxu0 0.0
  %1217 = vmatprep.subr.mxu0 0.0
  %1218 = vmatpush1.msra.mxu0 0.0
  %1219 = vmatprep.subr.mxu0 0.0
  %1220 = vmatpush1.msra.mxu0 0.0
  %1221 = vmatprep.subr.mxu0 0.0
  %1222 = vmatpush1.msra.mxu0 0.0
  %1223 = vmatprep.subr.mxu0 0.0
  %1224 = vmatpush1.msra.mxu0 0.0
  %1225 = vmatprep.subr.mxu0 0.0
  %1226 = vmatpush1.msra.mxu0 0.0
  %1227 = vmatprep.subr.mxu0 0.0
  %1228 = vmatpush1.msra.mxu0 0.0
  %1229 = vmatprep.subr.mxu0 0.0
  %1230 = vmatpush1.msra.mxu0 0.0
  %1231 = vmatprep.subr.mxu0 0.0
  %1232 = vmatpush1.msra.mxu0 0.0
  %1233 = vmatprep.subr.mxu0 0.0
  %1234 = vmatpush1.msra.mxu0 0.0
  %1235 = vmatprep.subr.mxu0 0.0
  %1236 = vmatpush1.msra.mxu0 %v1203
  %1237 = vmatprep.subr.mxu0 0.0
  %1238 = vmatpush2.msra.mxu0 0.0
  %1239 = vmatprep.subr.mxu0 0.0
  %1240 = vmatpush2.msra.mxu0 0.0
  %1241 = vmatprep.subr.mxu0 0.0
  %1242 = vmatpush2.msra.mxu0 0.0
  %1243 = vmatprep.subr.mxu0 0.0
  %1244 = vmatpush2.msra.mxu0 0.0
  %1245 = vmatprep.subr.mxu0 0.0
  %1246 = vmatpush2.msra.mxu0 0.0
  %1247 = vmatprep.subr.mxu0 0.0
  %1248 = vmatpush2.msra.mxu0 0.0
  %1249 = vmatprep.subr.mxu0 0.0
  %1250 = vmatpush2.msra.mxu0 0.0
  %1251 = vmatprep.subr.mxu0 0.0
  %1252 = vmatpush2.msra.mxu0 0.0
  %1253 = vmatprep.subr.mxu0 0.0
  %1254 = vmatpush2.msra.mxu0 0.0
  %1255 = vmatprep.subr.mxu0 0.0
  %1256 = vmatpush2.msra.mxu0 0.0
  %1257 = vmatprep.subr.mxu0 0.0
  %1258 = vmatpush2.msra.mxu0 0.0
  %1259 = vmatprep.subr.mxu0 0.0
  %1260 = vmatpush2.msra.mxu0 0.0
  %1261 = vmatprep.subr.mxu0 0.0
  %1262 = vmatpush2.msra.mxu0 0.0
  %1263 = vmatprep.subr.mxu0 0.0
  %1264 = vmatpush2.msra.mxu0 0.0
  %1265 = vmatprep.subr.mxu0 0.0
  %1266 = vmatpush2.msra.mxu0 0.0
  %1267 = vmatprep.subr.mxu0 0.0
  %1268 = vmatpush2.msra.mxu0 0.0
  %1269 = vmatprep.mubr.f32.mxu0 0.0
  %1270 = vmatmul.mubr.f32.gmra.mxu0 %v1011
  %v1271 = vpop.f32.mrf.mxu0
  %v1272 = vadd.f32 %v692, %v1271
  %v1273 = vpop.f32.mrf.mxu0
  %1274 = vmatprep.mubr.f32.mxu0 0.0
  %1275 = vmatmul.mubr.f32.gmra.mxu0 %v1014
  %v1276 = vpop.f32.mrf.mxu0
  %v1277 = vadd.f32 %v697, %v1276
  %v1278 = vpop.f32.mrf.mxu0
  %1279 = vmatprep.mubr.f32.mxu0 0.0
  %1280 = vmatmul.mubr.f32.gmra.mxu0 %v1017
  %v1281 = vpop.f32.mrf.mxu0
  %v1282 = vadd.f32 %v702, %v1281
  %v1283 = vpop.f32.mrf.mxu0
  %1284 = vmatprep.mubr.f32.mxu0 0.0
  %1285 = vmatmul.mubr.f32.gmra.mxu0 %v1020
  %v1286 = vpop.f32.mrf.mxu0
  %v1287 = vadd.f32 %v707, %v1286
  %v1288 = vpop.f32.mrf.mxu0
  %1289 = vmatprep.mubr.f32.mxu0 0.0
  %1290 = vmatmul.mubr.f32.gmra.mxu0 %v1023
  %v1291 = vpop.f32.mrf.mxu0
  %v1292 = vadd.f32 %v712, %v1291
  %v1293 = vpop.f32.mrf.mxu0
  %1294 = vmatprep.mubr.f32.mxu0 0.0
  %1295 = vmatmul.mubr.f32.gmra.mxu0 %v1026
  %v1296 = vpop.f32.mrf.mxu0
  %v1297 = vadd.f32 %v717, %v1296
  %v1298 = vpop.f32.mrf.mxu0
  %1299 = vmatprep.mubr.f32.mxu0 0.0
  %1300 = vmatmul.mubr.f32.gmra.mxu0 %v1029
  %v1301 = vpop.f32.mrf.mxu0
  %v1302 = vadd.f32 %v722, %v1301
  %v1303 = vpop.f32.mrf.mxu0
  %1304 = vmatprep.mubr.f32.mxu0 0.0
  %1305 = vmatmul.mubr.f32.gmra.mxu0 %v1032
  %v1306 = vpop.f32.mrf.mxu0
  %v1307 = vadd.f32 %v727, %v1306
  %v1308 = vpop.f32.mrf.mxu0
  %1309 = vmatprep.mubr.f32.mxu0 0.0
  %1310 = vmatmul.mubr.f32.gmra.mxu0 %v1035
  %v1311 = vpop.f32.mrf.mxu0
  %v1312 = vadd.f32 %v732, %v1311
  %v1313 = vpop.f32.mrf.mxu0
  %1314 = vmatprep.mubr.f32.mxu0 0.0
  %1315 = vmatmul.mubr.f32.gmra.mxu0 %v1038
  %v1316 = vpop.f32.mrf.mxu0
  %v1317 = vadd.f32 %v737, %v1316
  %v1318 = vpop.f32.mrf.mxu0
  %1319 = vmatprep.mubr.f32.mxu0 0.0
  %1320 = vmatmul.mubr.f32.gmra.mxu0 %v1041
  %v1321 = vpop.f32.mrf.mxu0
  %v1322 = vadd.f32 %v742, %v1321
  %v1323 = vpop.f32.mrf.mxu0
  %1324 = vmatprep.mubr.f32.mxu0 0.0
  %1325 = vmatmul.mubr.f32.gmra.mxu0 %v1044
  %v1326 = vpop.f32.mrf.mxu0
  %v1327 = vadd.f32 %v747, %v1326
  %v1328 = vpop.f32.mrf.mxu0
  %1329 = vmatprep.mubr.f32.mxu0 0.0
  %1330 = vmatmul.mubr.f32.gmra.mxu0 %v1047
  %v1331 = vpop.f32.mrf.mxu0
  %v1332 = vadd.f32 %v752, %v1331
  %v1333 = vpop.f32.mrf.mxu0
  %1334 = vmatprep.mubr.f32.mxu0 0.0
  %1335 = vmatmul.mubr.f32.gmra.mxu0 %v1050
  %v1336 = vpop.f32.mrf.mxu0
  %v1337 = vadd.f32 %v757, %v1336
  %v1338 = vpop.f32.mrf.mxu0
  %1339 = vmatprep.mubr.f32.mxu0 0.0
  %1340 = vmatmul.mubr.f32.gmra.mxu0 %v1053
  %v1341 = vpop.f32.mrf.mxu0
  %v1342 = vadd.f32 %v762, %v1341
  %v1343 = vpop.f32.mrf.mxu0
  %1344 = vmatprep.mubr.f32.mxu0 0.0
  %1345 = vmatmul.mubr.f32.gmra.mxu0 %v1056
  %v1346 = vpop.f32.mrf.mxu0
  %v1347 = vadd.f32 %v767, %v1346
  %v1348 = vpop.f32.mrf.mxu0
  %1349 = vmatprep.mubr.f32.mxu0 0.0
  %1350 = vmatmul.mubr.f32.gmra.mxu0 %v1059
  %v1351 = vpop.f32.mrf.mxu0
  %v1352 = vadd.f32 %v772, %v1351
  %v1353 = vpop.f32.mrf.mxu0
  %1354 = vmatprep.mubr.f32.mxu0 0.0
  %1355 = vmatmul.mubr.f32.gmra.mxu0 %v1062
  %v1356 = vpop.f32.mrf.mxu0
  %v1357 = vadd.f32 %v777, %v1356
  %v1358 = vpop.f32.mrf.mxu0
  %1359 = vmatprep.mubr.f32.mxu0 0.0
  %1360 = vmatmul.mubr.f32.gmra.mxu0 %v1065
  %v1361 = vpop.f32.mrf.mxu0
  %v1362 = vadd.f32 %v782, %v1361
  %v1363 = vpop.f32.mrf.mxu0
  %1364 = vmatprep.mubr.f32.mxu0 0.0
  %1365 = vmatmul.mubr.f32.gmra.mxu0 %v1068
  %v1366 = vpop.f32.mrf.mxu0
  %v1367 = vadd.f32 %v787, %v1366
  %v1368 = vpop.f32.mrf.mxu0
  %1369 = vmatprep.mubr.f32.mxu0 0.0
  %1370 = vmatmul.mubr.f32.gmra.mxu0 %v1071
  %v1371 = vpop.f32.mrf.mxu0
  %v1372 = vadd.f32 %v792, %v1371
  %v1373 = vpop.f32.mrf.mxu0
  %1374 = vmatprep.mubr.f32.mxu0 0.0
  %1375 = vmatmul.mubr.f32.gmra.mxu0 %v1074
  %v1376 = vpop.f32.mrf.mxu0
  %v1377 = vadd.f32 %v797, %v1376
  %v1378 = vpop.f32.mrf.mxu0
  %1379 = vmatprep.mubr.f32.mxu0 0.0
  %1380 = vmatmul.mubr.f32.gmra.mxu0 %v1077
  %v1381 = vpop.f32.mrf.mxu0
  %v1382 = vadd.f32 %v802, %v1381
  %v1383 = vpop.f32.mrf.mxu0
  %1384 = vmatprep.mubr.f32.mxu0 0.0
  %1385 = vmatmul.mubr.f32.gmra.mxu0 %v1080
  %v1386 = vpop.f32.mrf.mxu0
  %v1387 = vadd.f32 %v807, %v1386
  %v1388 = vpop.f32.mrf.mxu0
  %1389 = vmatprep.mubr.f32.mxu0 0.0
  %1390 = vmatmul.mubr.f32.gmra.mxu0 %v1083
  %v1391 = vpop.f32.mrf.mxu0
  %v1392 = vadd.f32 %v812, %v1391
  %v1393 = vpop.f32.mrf.mxu0
  %1394 = vmatprep.mubr.f32.mxu0 0.0
  %1395 = vmatmul.mubr.f32.gmra.mxu0 %v1086
  %v1396 = vpop.f32.mrf.mxu0
  %v1397 = vadd.f32 %v817, %v1396
  %v1398 = vpop.f32.mrf.mxu0
  %1399 = vmatprep.mubr.f32.mxu0 0.0
  %1400 = vmatmul.mubr.f32.gmra.mxu0 %v1089
  %v1401 = vpop.f32.mrf.mxu0
  %v1402 = vadd.f32 %v822, %v1401
  %v1403 = vpop.f32.mrf.mxu0
  %1404 = vmatprep.mubr.f32.mxu0 0.0
  %1405 = vmatmul.mubr.f32.gmra.mxu0 %v1092
  %v1406 = vpop.f32.mrf.mxu0
  %v1407 = vadd.f32 %v827, %v1406
  %v1408 = vpop.f32.mrf.mxu0
  %1409 = vmatprep.mubr.f32.mxu0 0.0
  %1410 = vmatmul.mubr.f32.gmra.mxu0 %v1095
  %v1411 = vpop.f32.mrf.mxu0
  %v1412 = vadd.f32 %v832, %v1411
  %v1413 = vpop.f32.mrf.mxu0
  %1414 = vmatprep.mubr.f32.mxu0 0.0
  %1415 = vmatmul.mubr.f32.gmra.mxu0 %v1098
  %v1416 = vpop.f32.mrf.mxu0
  %v1417 = vadd.f32 %v837, %v1416
  %v1418 = vpop.f32.mrf.mxu0
  %1419 = vmatprep.mubr.f32.mxu0 0.0
  %1420 = vmatmul.mubr.f32.gmra.mxu0 %v1101
  %v1421 = vpop.f32.mrf.mxu0
  %v1422 = vadd.f32 %v842, %v1421
  %v1423 = vpop.f32.mrf.mxu0
  %1424 = vmatprep.mubr.f32.mxu0 0.0
  %1425 = vmatmul.mubr.f32.gmra.mxu0 %v1104
  %v1426 = vpop.f32.mrf.mxu0
  %v1427 = vadd.f32 %v847, %v1426
  %v1428 = vpop.f32.mrf.mxu0
  %1429 = vmatprep.mubr.f32.mxu0 0.0
  %1430 = vmatmul.mubr.f32.gmra.mxu0 %v1107
  %v1431 = vpop.f32.mrf.mxu0
  %v1432 = vadd.f32 %v852, %v1431
  %v1433 = vpop.f32.mrf.mxu0
  %1434 = vmatprep.mubr.f32.mxu0 0.0
  %1435 = vmatmul.mubr.f32.gmra.mxu0 %v1110
  %v1436 = vpop.f32.mrf.mxu0
  %v1437 = vadd.f32 %v857, %v1436
  %v1438 = vpop.f32.mrf.mxu0
  %1439 = vmatprep.mubr.f32.mxu0 0.0
  %1440 = vmatmul.mubr.f32.gmra.mxu0 %v1113
  %v1441 = vpop.f32.mrf.mxu0
  %v1442 = vadd.f32 %v862, %v1441
  %v1443 = vpop.f32.mrf.mxu0
  %1444 = vmatprep.mubr.f32.mxu0 0.0
  %1445 = vmatmul.mubr.f32.gmra.mxu0 %v1116
  %v1446 = vpop.f32.mrf.mxu0
  %v1447 = vadd.f32 %v867, %v1446
  %v1448 = vpop.f32.mrf.mxu0
  %1449 = vmatprep.mubr.f32.mxu0 0.0
  %1450 = vmatmul.mubr.f32.gmra.mxu0 %v1119
  %v1451 = vpop.f32.mrf.mxu0
  %v1452 = vadd.f32 %v872, %v1451
  %v1453 = vpop.f32.mrf.mxu0
  %1454 = vmatprep.mubr.f32.mxu0 0.0
  %1455 = vmatmul.mubr.f32.gmra.mxu0 %v1122
  %v1456 = vpop.f32.mrf.mxu0
  %v1457 = vadd.f32 %v877, %v1456
  %v1458 = vpop.f32.mrf.mxu0
  %1459 = vmatprep.mubr.f32.mxu0 0.0
  %1460 = vmatmul.mubr.f32.gmra.mxu0 %v1125
  %v1461 = vpop.f32.mrf.mxu0
  %v1462 = vadd.f32 %v882, %v1461
  %v1463 = vpop.f32.mrf.mxu0
  %1464 = vmatprep.mubr.f32.mxu0 0.0
  %1465 = vmatmul.mubr.f32.gmra.mxu0 %v1128
  %v1466 = vpop.f32.mrf.mxu0
  %v1467 = vadd.f32 %v887, %v1466
  %v1468 = vpop.f32.mrf.mxu0
  %1469 = vmatprep.mubr.f32.mxu0 0.0
  %1470 = vmatmul.mubr.f32.gmra.mxu0 %v1131
  %v1471 = vpop.f32.mrf.mxu0
  %v1472 = vadd.f32 %v892, %v1471
  %v1473 = vpop.f32.mrf.mxu0
  %1474 = vmatprep.mubr.f32.mxu0 0.0
  %1475 = vmatmul.mubr.f32.gmra.mxu0 %v1134
  %v1476 = vpop.f32.mrf.mxu0
  %v1477 = vadd.f32 %v897, %v1476
  %v1478 = vpop.f32.mrf.mxu0
  %1479 = vmatprep.mubr.f32.mxu0 0.0
  %1480 = vmatmul.mubr.f32.gmra.mxu0 %v1137
  %v1481 = vpop.f32.mrf.mxu0
  %v1482 = vadd.f32 %v902, %v1481
  %v1483 = vpop.f32.mrf.mxu0
  %1484 = vmatprep.mubr.f32.mxu0 0.0
  %1485 = vmatmul.mubr.f32.gmra.mxu0 %v1140
  %v1486 = vpop.f32.mrf.mxu0
  %v1487 = vadd.f32 %v907, %v1486
  %v1488 = vpop.f32.mrf.mxu0
  %1489 = vmatprep.mubr.f32.mxu0 0.0
  %1490 = vmatmul.mubr.f32.gmra.mxu0 %v1143
  %v1491 = vpop.f32.mrf.mxu0
  %v1492 = vadd.f32 %v912, %v1491
  %v1493 = vpop.f32.mrf.mxu0
  %1494 = vmatprep.mubr.f32.mxu0 0.0
  %1495 = vmatmul.mubr.f32.gmra.mxu0 %v1146
  %v1496 = vpop.f32.mrf.mxu0
  %v1497 = vadd.f32 %v917, %v1496
  %v1498 = vpop.f32.mrf.mxu0
  %1499 = vmatprep.mubr.f32.mxu0 0.0
  %1500 = vmatmul.mubr.f32.gmra.mxu0 %v1149
  %v1501 = vpop.f32.mrf.mxu0
  %v1502 = vadd.f32 %v922, %v1501
  %v1503 = vpop.f32.mrf.mxu0
  %1504 = vmatprep.mubr.f32.mxu0 0.0
  %1505 = vmatmul.mubr.f32.gmra.mxu0 %v1152
  %v1506 = vpop.f32.mrf.mxu0
  %v1507 = vadd.f32 %v927, %v1506
  %v1508 = vpop.f32.mrf.mxu0
  %1509 = vmatprep.mubr.f32.mxu0 0.0
  %1510 = vmatmul.mubr.f32.gmra.mxu0 %v1155
  %v1511 = vpop.f32.mrf.mxu0
  %v1512 = vadd.f32 %v932, %v1511
  %v1513 = vpop.f32.mrf.mxu0
  %1514 = vmatprep.mubr.f32.mxu0 0.0
  %1515 = vmatmul.mubr.f32.gmra.mxu0 %v1158
  %v1516 = vpop.f32.mrf.mxu0
  %v1517 = vadd.f32 %v937, %v1516
  %v1518 = vpop.f32.mrf.mxu0
  %1519 = vmatprep.mubr.f32.mxu0 0.0
  %1520 = vmatmul.mubr.f32.gmra.mxu0 %v1161
  %v1521 = vpop.f32.mrf.mxu0
  %v1522 = vadd.f32 %v942, %v1521
  %v1523 = vpop.f32.mrf.mxu0
  %1524 = vmatprep.mubr.f32.mxu0 0.0
  %1525 = vmatmul.mubr.f32.gmra.mxu0 %v1164
  %v1526 = vpop.f32.mrf.mxu0
  %v1527 = vadd.f32 %v947, %v1526
  %v1528 = vpop.f32.mrf.mxu0
  %1529 = vmatprep.mubr.f32.mxu0 0.0
  %1530 = vmatmul.mubr.f32.gmra.mxu0 %v1167
  %v1531 = vpop.f32.mrf.mxu0
  %v1532 = vadd.f32 %v952, %v1531
  %v1533 = vpop.f32.mrf.mxu0
  %1534 = vmatprep.mubr.f32.mxu0 0.0
  %1535 = vmatmul.mubr.f32.gmra.mxu0 %v1170
  %v1536 = vpop.f32.mrf.mxu0
  %v1537 = vadd.f32 %v957, %v1536
  %v1538 = vpop.f32.mrf.mxu0
  %1539 = vmatprep.mubr.f32.mxu0 0.0
  %1540 = vmatmul.mubr.f32.gmra.mxu0 %v1173
  %v1541 = vpop.f32.mrf.mxu0
  %v1542 = vadd.f32 %v962, %v1541
  %v1543 = vpop.f32.mrf.mxu0
  %1544 = vmatprep.mubr.f32.mxu0 0.0
  %1545 = vmatmul.mubr.f32.gmra.mxu0 %v1176
  %v1546 = vpop.f32.mrf.mxu0
  %v1547 = vadd.f32 %v967, %v1546
  %v1548 = vpop.f32.mrf.mxu0
  %1549 = vmatprep.mubr.f32.mxu0 0.0
  %1550 = vmatmul.mubr.f32.gmra.mxu0 %v1179
  %v1551 = vpop.f32.mrf.mxu0
  %v1552 = vadd.f32 %v972, %v1551
  %v1553 = vpop.f32.mrf.mxu0
  %1554 = vmatprep.mubr.f32.mxu0 0.0
  %1555 = vmatmul.mubr.f32.gmra.mxu0 %v1182
  %v1556 = vpop.f32.mrf.mxu0
  %v1557 = vadd.f32 %v977, %v1556
  %v1558 = vpop.f32.mrf.mxu0
  %1559 = vmatprep.mubr.f32.mxu0 0.0
  %1560 = vmatmul.mubr.f32.gmra.mxu0 %v1185
  %v1561 = vpop.f32.mrf.mxu0
  %v1562 = vadd.f32 %v982, %v1561
  %v1563 = vpop.f32.mrf.mxu0
  %1564 = vmatprep.mubr.f32.mxu0 0.0
  %1565 = vmatmul.mubr.f32.gmra.mxu0 %v1188
  %v1566 = vpop.f32.mrf.mxu0
  %v1567 = vadd.f32 %v987, %v1566
  %v1568 = vpop.f32.mrf.mxu0
  %1569 = vmatprep.mubr.f32.mxu0 0.0
  %1570 = vmatmul.mubr.f32.gmra.mxu0 %v1191
  %v1571 = vpop.f32.mrf.mxu0
  %v1572 = vadd.f32 %v992, %v1571
  %v1573 = vpop.f32.mrf.mxu0
  %1574 = vmatprep.mubr.f32.mxu0 0.0
  %1575 = vmatmul.mubr.f32.gmra.mxu0 %v1194
  %v1576 = vpop.f32.mrf.mxu0
  %v1577 = vadd.f32 %v997, %v1576
  %v1578 = vpop.f32.mrf.mxu0
  %1579 = vmatprep.mubr.f32.mxu0 0.0
  %1580 = vmatmul.mubr.f32.gmra.mxu0 %v1197
  %v1581 = vpop.f32.mrf.mxu0
  %v1582 = vadd.f32 %v1002, %v1581
  %v1583 = vpop.f32.mrf.mxu0
  %1584 = vmatprep.mubr.f32.mxu0 0.0
  %1585 = vmatmul.mubr.f32.gmra.mxu0 %v1200
  %v1586 = vpop.f32.mrf.mxu0
  %v1587 = vadd.f32 %v1007, %v1586
  %v1588 = vpop.f32.mrf.mxu0
  %1589 = vdwg.mxu0
  %v1590 = vld [vmem:[#allocation2 + $0x2] sm:$0xff]
  %v1591 = vld [vmem:[#allocation2 + $0xa] sm:$0xff]
  %v1592 = vld [vmem:[#allocation2 + $0x1a] sm:$0xff]
  %v1593 = vld [vmem:[#allocation2 + $0x22] sm:$0xff]
  %v1594 = vld [vmem:[#allocation2 + $0x32] sm:$0xff]
  %v1595 = vld [vmem:[#allocation2 + $0x3a] sm:$0xff]
  %v1596 = vld [vmem:[#allocation2 + $0x4a] sm:$0xff]
  %v1597 = vld [vmem:[#allocation2 + $0x52] sm:$0xff]
  %v1598 = vld [vmem:[#allocation2 + $0x62] sm:$0xff]
  %v1599 = vld [vmem:[#allocation2 + $0x6a] sm:$0xff]
  %v1600 = vld [vmem:[#allocation2 + $0x7a] sm:$0xff]
  %v1601 = vld [vmem:[#allocation2 + $0x82] sm:$0xff]
  %v1602 = vld [vmem:[#allocation2 + $0x92] sm:$0xff]
  %v1603 = vld [vmem:[#allocation2 + $0x9a] sm:$0xff]
  %v1604 = vld [vmem:[#allocation2 + $0xaa] sm:$0xff]
  %v1605 = vld [vmem:[#allocation2 + $0xb2] sm:$0xff]
  %v1606 = vld [vmem:[#allocation2 + $0xc2] sm:$0xff]
  %v1607 = vld [vmem:[#allocation2 + $0xca] sm:$0xff]
  %v1608 = vld [vmem:[#allocation2 + $0xda] sm:$0xff]
  %v1609 = vld [vmem:[#allocation2 + $0xe2] sm:$0xff]
  %v1610 = vld [vmem:[#allocation2 + $0xf2] sm:$0xff]
  %v1611 = vld [vmem:[#allocation2 + $0xfa] sm:$0xff]
  %v1612 = vld [vmem:[#allocation2 + $0x10a] sm:$0xff]
  %v1613 = vld [vmem:[#allocation2 + $0x112] sm:$0xff]
  %v1614 = vld [vmem:[#allocation2 + $0x122] sm:$0xff]
  %v1615 = vld [vmem:[#allocation2 + $0x12a] sm:$0xff]
  %v1616 = vld [vmem:[#allocation2 + $0x13a] sm:$0xff]
  %v1617 = vld [vmem:[#allocation2 + $0x142] sm:$0xff]
  %v1618 = vld [vmem:[#allocation2 + $0x152] sm:$0xff]
  %v1619 = vld [vmem:[#allocation2 + $0x15a] sm:$0xff]
  %v1620 = vld [vmem:[#allocation2 + $0x16a] sm:$0xff]
  %v1621 = vld [vmem:[#allocation2 + $0x172] sm:$0xff]
  %v1622 = vld [vmem:[#allocation2 + $0x1b2] sm:$0xff]
  %v1623 = vld [vmem:[#allocation2 + $0x1ba] sm:$0xff]
  %v1624 = vld [vmem:[#allocation2 + $0x1ca] sm:$0xff]
  %v1625 = vld [vmem:[#allocation2 + $0x1d2] sm:$0xff]
  %v1626 = vld [vmem:[#allocation2 + $0x1e2] sm:$0xff]
  %v1627 = vld [vmem:[#allocation2 + $0x1ea] sm:$0xff]
  %v1628 = vld [vmem:[#allocation2 + $0x1fa] sm:$0xff]
  %v1629 = vld [vmem:[#allocation2 + $0x202] sm:$0xff]
  %v1630 = vld [vmem:[#allocation2 + $0x212] sm:$0xff]
  %v1631 = vld [vmem:[#allocation2 + $0x21a] sm:$0xff]
  %v1632 = vld [vmem:[#allocation2 + $0x22a] sm:$0xff]
  %v1633 = vld [vmem:[#allocation2 + $0x232] sm:$0xff]
  %v1634 = vld [vmem:[#allocation2 + $0x242] sm:$0xff]
  %v1635 = vld [vmem:[#allocation2 + $0x24a] sm:$0xff]
  %v1636 = vld [vmem:[#allocation2 + $0x25a] sm:$0xff]
  %v1637 = vld [vmem:[#allocation2 + $0x262] sm:$0xff]
  %v1638 = vld [vmem:[#allocation2 + $0x272] sm:$0xff]
  %v1639 = vld [vmem:[#allocation2 + $0x27a] sm:$0xff]
  %v1640 = vld [vmem:[#allocation2 + $0x28a] sm:$0xff]
  %v1641 = vld [vmem:[#allocation2 + $0x292] sm:$0xff]
  %v1642 = vld [vmem:[#allocation2 + $0x2a2] sm:$0xff]
  %v1643 = vld [vmem:[#allocation2 + $0x2aa] sm:$0xff]
  %v1644 = vld [vmem:[#allocation2 + $0x2ba] sm:$0xff]
  %v1645 = vld [vmem:[#allocation2 + $0x2c2] sm:$0xff]
  %v1646 = vld [vmem:[#allocation2 + $0x2d2] sm:$0xff]
  %v1647 = vld [vmem:[#allocation2 + $0x2da] sm:$0xff]
  %v1648 = vld [vmem:[#allocation2 + $0x2ea] sm:$0xff]
  %v1649 = vld [vmem:[#allocation2 + $0x2f2] sm:$0xff]
  %v1650 = vld [vmem:[#allocation2 + $0x302] sm:$0xff]
  %v1651 = vld [vmem:[#allocation2 + $0x30a] sm:$0xff]
  %v1652 = vld [vmem:[#allocation2 + $0x31a] sm:$0xff]
  %v1653 = vld [vmem:[#allocation2 + $0x322] sm:$0xff]
  %s1654 = scalar_lea.vmem %s1, 8
  %v1655 = vld [vmem:[%s1654] sm:$0xf]
  %v1657 = vsel %vm79, %v1590, 0
  %v1660 = vsel %vm79, %v1591, 0
  %v1663 = vsel %vm79, %v1592, 0
  %v1666 = vsel %vm79, %v1593, 0
  %v1669 = vsel %vm79, %v1594, 0
  %v1672 = vsel %vm79, %v1595, 0
  %v1675 = vsel %vm79, %v1596, 0
  %v1678 = vsel %vm79, %v1597, 0
  %v1681 = vsel %vm79, %v1598, 0
  %v1684 = vsel %vm79, %v1599, 0
  %v1687 = vsel %vm79, %v1600, 0
  %v1690 = vsel %vm79, %v1601, 0
  %v1693 = vsel %vm79, %v1602, 0
  %v1696 = vsel %vm79, %v1603, 0
  %v1699 = vsel %vm79, %v1604, 0
  %v1702 = vsel %vm79, %v1605, 0
  %v1705 = vsel %vm79, %v1606, 0
  %v1708 = vsel %vm79, %v1607, 0
  %v1711 = vsel %vm79, %v1608, 0
  %v1714 = vsel %vm79, %v1609, 0
  %v1717 = vsel %vm79, %v1610, 0
  %v1720 = vsel %vm79, %v1611, 0
  %v1723 = vsel %vm79, %v1612, 0
  %v1726 = vsel %vm79, %v1613, 0
  %v1729 = vsel %vm79, %v1614, 0
  %v1732 = vsel %vm79, %v1615, 0
  %v1735 = vsel %vm79, %v1616, 0
  %v1738 = vsel %vm79, %v1617, 0
  %v1741 = vsel %vm79, %v1618, 0
  %v1744 = vsel %vm79, %v1619, 0
  %v1747 = vsel %vm79, %v1620, 0
  %v1750 = vsel %vm79, %v1621, 0
  %v1753 = vsel %vm79, %v1622, 0
  %v1756 = vsel %vm79, %v1623, 0
  %v1759 = vsel %vm79, %v1624, 0
  %v1762 = vsel %vm79, %v1625, 0
  %v1765 = vsel %vm79, %v1626, 0
  %v1768 = vsel %vm79, %v1627, 0
  %v1771 = vsel %vm79, %v1628, 0
  %v1774 = vsel %vm79, %v1629, 0
  %v1777 = vsel %vm79, %v1630, 0
  %v1780 = vsel %vm79, %v1631, 0
  %v1783 = vsel %vm79, %v1632, 0
  %v1786 = vsel %vm79, %v1633, 0
  %v1789 = vsel %vm79, %v1634, 0
  %v1792 = vsel %vm79, %v1635, 0
  %v1795 = vsel %vm79, %v1636, 0
  %v1798 = vsel %vm79, %v1637, 0
  %v1801 = vsel %vm79, %v1638, 0
  %v1804 = vsel %vm79, %v1639, 0
  %v1807 = vsel %vm79, %v1640, 0
  %v1810 = vsel %vm79, %v1641, 0
  %v1813 = vsel %vm79, %v1642, 0
  %v1816 = vsel %vm79, %v1643, 0
  %v1819 = vsel %vm79, %v1644, 0
  %v1822 = vsel %vm79, %v1645, 0
  %v1825 = vsel %vm79, %v1646, 0
  %v1828 = vsel %vm79, %v1647, 0
  %v1831 = vsel %vm79, %v1648, 0
  %v1834 = vsel %vm79, %v1649, 0
  %v1837 = vsel %vm79, %v1650, 0
  %v1840 = vsel %vm79, %v1651, 0
  %v1843 = vsel %vm79, %v1652, 0
  %v1846 = vsel %vm79, %v1653, 0
  %v1849 = vsel %vm621, %v1655, 0
  %1851 = vmatprep.subr.mxu0 0.0
  %1852 = vmatpush1.msra.mxu0 0.0
  %1853 = vmatprep.subr.mxu0 0.0
  %1854 = vmatpush1.msra.mxu0 0.0
  %1855 = vmatprep.subr.mxu0 0.0
  %1856 = vmatpush1.msra.mxu0 0.0
  %1857 = vmatprep.subr.mxu0 0.0
  %1858 = vmatpush1.msra.mxu0 0.0
  %1859 = vmatprep.subr.mxu0 0.0
  %1860 = vmatpush1.msra.mxu0 0.0
  %1861 = vmatprep.subr.mxu0 0.0
  %1862 = vmatpush1.msra.mxu0 0.0
  %1863 = vmatprep.subr.mxu0 0.0
  %1864 = vmatpush1.msra.mxu0 0.0
  %1865 = vmatprep.subr.mxu0 0.0
  %1866 = vmatpush1.msra.mxu0 0.0
  %1867 = vmatprep.subr.mxu0 0.0
  %1868 = vmatpush1.msra.mxu0 0.0
  %1869 = vmatprep.subr.mxu0 0.0
  %1870 = vmatpush1.msra.mxu0 0.0
  %1871 = vmatprep.subr.mxu0 0.0
  %1872 = vmatpush1.msra.mxu0 0.0
  %1873 = vmatprep.subr.mxu0 0.0
  %1874 = vmatpush1.msra.mxu0 0.0
  %1875 = vmatprep.subr.mxu0 0.0
  %1876 = vmatpush1.msra.mxu0 0.0
  %1877 = vmatprep.subr.mxu0 0.0
  %1878 = vmatpush1.msra.mxu0 0.0
  %1879 = vmatprep.subr.mxu0 0.0
  %1880 = vmatpush1.msra.mxu0 0.0
  %1881 = vmatprep.subr.mxu0 0.0
  %1882 = vmatpush1.msra.mxu0 %v1849
  %1883 = vmatprep.subr.mxu0 0.0
  %1884 = vmatpush2.msra.mxu0 0.0
  %1885 = vmatprep.subr.mxu0 0.0
  %1886 = vmatpush2.msra.mxu0 0.0
  %1887 = vmatprep.subr.mxu0 0.0
  %1888 = vmatpush2.msra.mxu0 0.0
  %1889 = vmatprep.subr.mxu0 0.0
  %1890 = vmatpush2.msra.mxu0 0.0
  %1891 = vmatprep.subr.mxu0 0.0
  %1892 = vmatpush2.msra.mxu0 0.0
  %1893 = vmatprep.subr.mxu0 0.0
  %1894 = vmatpush2.msra.mxu0 0.0
  %1895 = vmatprep.subr.mxu0 0.0
  %1896 = vmatpush2.msra.mxu0 0.0
  %1897 = vmatprep.subr.mxu0 0.0
  %1898 = vmatpush2.msra.mxu0 0.0
  %1899 = vmatprep.subr.mxu0 0.0
  %1900 = vmatpush2.msra.mxu0 0.0
  %1901 = vmatprep.subr.mxu0 0.0
  %1902 = vmatpush2.msra.mxu0 0.0
  %1903 = vmatprep.subr.mxu0 0.0
  %1904 = vmatpush2.msra.mxu0 0.0
  %1905 = vmatprep.subr.mxu0 0.0
  %1906 = vmatpush2.msra.mxu0 0.0
  %1907 = vmatprep.subr.mxu0 0.0
  %1908 = vmatpush2.msra.mxu0 0.0
  %1909 = vmatprep.subr.mxu0 0.0
  %1910 = vmatpush2.msra.mxu0 0.0
  %1911 = vmatprep.subr.mxu0 0.0
  %1912 = vmatpush2.msra.mxu0 0.0
  %1913 = vmatprep.subr.mxu0 0.0
  %1914 = vmatpush2.msra.mxu0 0.0
  %1915 = vmatprep.mubr.f32.mxu0 0.0
  %1916 = vmatmul.mubr.f32.gmra.mxu0 %v1657
  %v1917 = vpop.f32.mrf.mxu0
  %v1918 = vadd.f32 0.0, %v1917
  %v1919 = vpop.f32.mrf.mxu0
  %1920 = vmatprep.mubr.f32.mxu0 0.0
  %1921 = vmatmul.mubr.f32.gmra.mxu0 %v1660
  %v1922 = vpop.f32.mrf.mxu0
  %v1923 = vadd.f32 0.0, %v1922
  %v1924 = vpop.f32.mrf.mxu0
  %1925 = vmatprep.mubr.f32.mxu0 0.0
  %1926 = vmatmul.mubr.f32.gmra.mxu0 %v1663
  %v1927 = vpop.f32.mrf.mxu0
  %v1928 = vadd.f32 0.0, %v1927
  %v1929 = vpop.f32.mrf.mxu0
  %1930 = vmatprep.mubr.f32.mxu0 0.0
  %1931 = vmatmul.mubr.f32.gmra.mxu0 %v1666
  %v1932 = vpop.f32.mrf.mxu0
  %v1933 = vadd.f32 0.0, %v1932
  %v1934 = vpop.f32.mrf.mxu0
  %1935 = vmatprep.mubr.f32.mxu0 0.0
  %1936 = vmatmul.mubr.f32.gmra.mxu0 %v1669
  %v1937 = vpop.f32.mrf.mxu0
  %v1938 = vadd.f32 0.0, %v1937
  %v1939 = vpop.f32.mrf.mxu0
  %1940 = vmatprep.mubr.f32.mxu0 0.0
  %1941 = vmatmul.mubr.f32.gmra.mxu0 %v1672
  %v1942 = vpop.f32.mrf.mxu0
  %v1943 = vadd.f32 0.0, %v1942
  %v1944 = vpop.f32.mrf.mxu0
  %1945 = vmatprep.mubr.f32.mxu0 0.0
  %1946 = vmatmul.mubr.f32.gmra.mxu0 %v1675
  %v1947 = vpop.f32.mrf.mxu0
  %v1948 = vadd.f32 0.0, %v1947
  %v1949 = vpop.f32.mrf.mxu0
  %1950 = vmatprep.mubr.f32.mxu0 0.0
  %1951 = vmatmul.mubr.f32.gmra.mxu0 %v1678
  %v1952 = vpop.f32.mrf.mxu0
  %v1953 = vadd.f32 0.0, %v1952
  %v1954 = vpop.f32.mrf.mxu0
  %1955 = vmatprep.mubr.f32.mxu0 0.0
  %1956 = vmatmul.mubr.f32.gmra.mxu0 %v1681
  %v1957 = vpop.f32.mrf.mxu0
  %v1958 = vadd.f32 0.0, %v1957
  %v1959 = vpop.f32.mrf.mxu0
  %1960 = vmatprep.mubr.f32.mxu0 0.0
  %1961 = vmatmul.mubr.f32.gmra.mxu0 %v1684
  %v1962 = vpop.f32.mrf.mxu0
  %v1963 = vadd.f32 0.0, %v1962
  %v1964 = vpop.f32.mrf.mxu0
  %1965 = vmatprep.mubr.f32.mxu0 0.0
  %1966 = vmatmul.mubr.f32.gmra.mxu0 %v1687
  %v1967 = vpop.f32.mrf.mxu0
  %v1968 = vadd.f32 0.0, %v1967
  %v1969 = vpop.f32.mrf.mxu0
  %1970 = vmatprep.mubr.f32.mxu0 0.0
  %1971 = vmatmul.mubr.f32.gmra.mxu0 %v1690
  %v1972 = vpop.f32.mrf.mxu0
  %v1973 = vadd.f32 0.0, %v1972
  %v1974 = vpop.f32.mrf.mxu0
  %1975 = vmatprep.mubr.f32.mxu0 0.0
  %1976 = vmatmul.mubr.f32.gmra.mxu0 %v1693
  %v1977 = vpop.f32.mrf.mxu0
  %v1978 = vadd.f32 0.0, %v1977
  %v1979 = vpop.f32.mrf.mxu0
  %1980 = vmatprep.mubr.f32.mxu0 0.0
  %1981 = vmatmul.mubr.f32.gmra.mxu0 %v1696
  %v1982 = vpop.f32.mrf.mxu0
  %v1983 = vadd.f32 0.0, %v1982
  %v1984 = vpop.f32.mrf.mxu0
  %1985 = vmatprep.mubr.f32.mxu0 0.0
  %1986 = vmatmul.mubr.f32.gmra.mxu0 %v1699
  %v1987 = vpop.f32.mrf.mxu0
  %v1988 = vadd.f32 0.0, %v1987
  %v1989 = vpop.f32.mrf.mxu0
  %1990 = vmatprep.mubr.f32.mxu0 0.0
  %1991 = vmatmul.mubr.f32.gmra.mxu0 %v1702
  %v1992 = vpop.f32.mrf.mxu0
  %v1993 = vadd.f32 0.0, %v1992
  %v1994 = vpop.f32.mrf.mxu0
  %1995 = vmatprep.mubr.f32.mxu0 0.0
  %1996 = vmatmul.mubr.f32.gmra.mxu0 %v1705
  %v1997 = vpop.f32.mrf.mxu0
  %v1998 = vadd.f32 0.0, %v1997
  %v1999 = vpop.f32.mrf.mxu0
  %2000 = vmatprep.mubr.f32.mxu0 0.0
  %2001 = vmatmul.mubr.f32.gmra.mxu0 %v1708
  %v2002 = vpop.f32.mrf.mxu0
  %v2003 = vadd.f32 0.0, %v2002
  %v2004 = vpop.f32.mrf.mxu0
  %2005 = vmatprep.mubr.f32.mxu0 0.0
  %2006 = vmatmul.mubr.f32.gmra.mxu0 %v1711
  %v2007 = vpop.f32.mrf.mxu0
  %v2008 = vadd.f32 0.0, %v2007
  %v2009 = vpop.f32.mrf.mxu0
  %2010 = vmatprep.mubr.f32.mxu0 0.0
  %2011 = vmatmul.mubr.f32.gmra.mxu0 %v1714
  %v2012 = vpop.f32.mrf.mxu0
  %v2013 = vadd.f32 0.0, %v2012
  %v2014 = vpop.f32.mrf.mxu0
  %2015 = vmatprep.mubr.f32.mxu0 0.0
  %2016 = vmatmul.mubr.f32.gmra.mxu0 %v1717
  %v2017 = vpop.f32.mrf.mxu0
  %v2018 = vadd.f32 0.0, %v2017
  %v2019 = vpop.f32.mrf.mxu0
  %2020 = vmatprep.mubr.f32.mxu0 0.0
  %2021 = vmatmul.mubr.f32.gmra.mxu0 %v1720
  %v2022 = vpop.f32.mrf.mxu0
  %v2023 = vadd.f32 0.0, %v2022
  %v2024 = vpop.f32.mrf.mxu0
  %2025 = vmatprep.mubr.f32.mxu0 0.0
  %2026 = vmatmul.mubr.f32.gmra.mxu0 %v1723
  %v2027 = vpop.f32.mrf.mxu0
  %v2028 = vadd.f32 0.0, %v2027
  %v2029 = vpop.f32.mrf.mxu0
  %2030 = vmatprep.mubr.f32.mxu0 0.0
  %2031 = vmatmul.mubr.f32.gmra.mxu0 %v1726
  %v2032 = vpop.f32.mrf.mxu0
  %v2033 = vadd.f32 0.0, %v2032
  %v2034 = vpop.f32.mrf.mxu0
  %2035 = vmatprep.mubr.f32.mxu0 0.0
  %2036 = vmatmul.mubr.f32.gmra.mxu0 %v1729
  %v2037 = vpop.f32.mrf.mxu0
  %v2038 = vadd.f32 0.0, %v2037
  %v2039 = vpop.f32.mrf.mxu0
  %2040 = vmatprep.mubr.f32.mxu0 0.0
  %2041 = vmatmul.mubr.f32.gmra.mxu0 %v1732
  %v2042 = vpop.f32.mrf.mxu0
  %v2043 = vadd.f32 0.0, %v2042
  %v2044 = vpop.f32.mrf.mxu0
  %2045 = vmatprep.mubr.f32.mxu0 0.0
  %2046 = vmatmul.mubr.f32.gmra.mxu0 %v1735
  %v2047 = vpop.f32.mrf.mxu0
  %v2048 = vadd.f32 0.0, %v2047
  %v2049 = vpop.f32.mrf.mxu0
  %2050 = vmatprep.mubr.f32.mxu0 0.0
  %2051 = vmatmul.mubr.f32.gmra.mxu0 %v1738
  %v2052 = vpop.f32.mrf.mxu0
  %v2053 = vadd.f32 0.0, %v2052
  %v2054 = vpop.f32.mrf.mxu0
  %2055 = vmatprep.mubr.f32.mxu0 0.0
  %2056 = vmatmul.mubr.f32.gmra.mxu0 %v1741
  %v2057 = vpop.f32.mrf.mxu0
  %v2058 = vadd.f32 0.0, %v2057
  %v2059 = vpop.f32.mrf.mxu0
  %2060 = vmatprep.mubr.f32.mxu0 0.0
  %2061 = vmatmul.mubr.f32.gmra.mxu0 %v1744
  %v2062 = vpop.f32.mrf.mxu0
  %v2063 = vadd.f32 0.0, %v2062
  %v2064 = vpop.f32.mrf.mxu0
  %2065 = vmatprep.mubr.f32.mxu0 0.0
  %2066 = vmatmul.mubr.f32.gmra.mxu0 %v1747
  %v2067 = vpop.f32.mrf.mxu0
  %v2068 = vadd.f32 0.0, %v2067
  %v2069 = vpop.f32.mrf.mxu0
  %2070 = vmatprep.mubr.f32.mxu0 0.0
  %2071 = vmatmul.mubr.f32.gmra.mxu0 %v1750
  %v2072 = vpop.f32.mrf.mxu0
  %v2073 = vadd.f32 0.0, %v2072
  %v2074 = vpop.f32.mrf.mxu0
  %2075 = vmatprep.mubr.f32.mxu0 0.0
  %2076 = vmatmul.mubr.f32.gmra.mxu0 %v1753
  %v2077 = vpop.f32.mrf.mxu0
  %v2078 = vadd.f32 0.0, %v2077
  %v2079 = vpop.f32.mrf.mxu0
  %2080 = vmatprep.mubr.f32.mxu0 0.0
  %2081 = vmatmul.mubr.f32.gmra.mxu0 %v1756
  %v2082 = vpop.f32.mrf.mxu0
  %v2083 = vadd.f32 0.0, %v2082
  %v2084 = vpop.f32.mrf.mxu0
  %2085 = vmatprep.mubr.f32.mxu0 0.0
  %2086 = vmatmul.mubr.f32.gmra.mxu0 %v1759
  %v2087 = vpop.f32.mrf.mxu0
  %v2088 = vadd.f32 0.0, %v2087
  %v2089 = vpop.f32.mrf.mxu0
  %2090 = vmatprep.mubr.f32.mxu0 0.0
  %2091 = vmatmul.mubr.f32.gmra.mxu0 %v1762
  %v2092 = vpop.f32.mrf.mxu0
  %v2093 = vadd.f32 0.0, %v2092
  %v2094 = vpop.f32.mrf.mxu0
  %2095 = vmatprep.mubr.f32.mxu0 0.0
  %2096 = vmatmul.mubr.f32.gmra.mxu0 %v1765
  %v2097 = vpop.f32.mrf.mxu0
  %v2098 = vadd.f32 0.0, %v2097
  %v2099 = vpop.f32.mrf.mxu0
  %2100 = vmatprep.mubr.f32.mxu0 0.0
  %2101 = vmatmul.mubr.f32.gmra.mxu0 %v1768
  %v2102 = vpop.f32.mrf.mxu0
  %v2103 = vadd.f32 0.0, %v2102
  %v2104 = vpop.f32.mrf.mxu0
  %2105 = vmatprep.mubr.f32.mxu0 0.0
  %2106 = vmatmul.mubr.f32.gmra.mxu0 %v1771
  %v2107 = vpop.f32.mrf.mxu0
  %v2108 = vadd.f32 0.0, %v2107
  %v2109 = vpop.f32.mrf.mxu0
  %2110 = vmatprep.mubr.f32.mxu0 0.0
  %2111 = vmatmul.mubr.f32.gmra.mxu0 %v1774
  %v2112 = vpop.f32.mrf.mxu0
  %v2113 = vadd.f32 0.0, %v2112
  %v2114 = vpop.f32.mrf.mxu0
  %2115 = vmatprep.mubr.f32.mxu0 0.0
  %2116 = vmatmul.mubr.f32.gmra.mxu0 %v1777
  %v2117 = vpop.f32.mrf.mxu0
  %v2118 = vadd.f32 0.0, %v2117
  %v2119 = vpop.f32.mrf.mxu0
  %2120 = vmatprep.mubr.f32.mxu0 0.0
  %2121 = vmatmul.mubr.f32.gmra.mxu0 %v1780
  %v2122 = vpop.f32.mrf.mxu0
  %v2123 = vadd.f32 0.0, %v2122
  %v2124 = vpop.f32.mrf.mxu0
  %2125 = vmatprep.mubr.f32.mxu0 0.0
  %2126 = vmatmul.mubr.f32.gmra.mxu0 %v1783
  %v2127 = vpop.f32.mrf.mxu0
  %v2128 = vadd.f32 0.0, %v2127
  %v2129 = vpop.f32.mrf.mxu0
  %2130 = vmatprep.mubr.f32.mxu0 0.0
  %2131 = vmatmul.mubr.f32.gmra.mxu0 %v1786
  %v2132 = vpop.f32.mrf.mxu0
  %v2133 = vadd.f32 0.0, %v2132
  %v2134 = vpop.f32.mrf.mxu0
  %2135 = vmatprep.mubr.f32.mxu0 0.0
  %2136 = vmatmul.mubr.f32.gmra.mxu0 %v1789
  %v2137 = vpop.f32.mrf.mxu0
  %v2138 = vadd.f32 0.0, %v2137
  %v2139 = vpop.f32.mrf.mxu0
  %2140 = vmatprep.mubr.f32.mxu0 0.0
  %2141 = vmatmul.mubr.f32.gmra.mxu0 %v1792
  %v2142 = vpop.f32.mrf.mxu0
  %v2143 = vadd.f32 0.0, %v2142
  %v2144 = vpop.f32.mrf.mxu0
  %2145 = vmatprep.mubr.f32.mxu0 0.0
  %2146 = vmatmul.mubr.f32.gmra.mxu0 %v1795
  %v2147 = vpop.f32.mrf.mxu0
  %v2148 = vadd.f32 0.0, %v2147
  %v2149 = vpop.f32.mrf.mxu0
  %2150 = vmatprep.mubr.f32.mxu0 0.0
  %2151 = vmatmul.mubr.f32.gmra.mxu0 %v1798
  %v2152 = vpop.f32.mrf.mxu0
  %v2153 = vadd.f32 0.0, %v2152
  %v2154 = vpop.f32.mrf.mxu0
  %2155 = vmatprep.mubr.f32.mxu0 0.0
  %2156 = vmatmul.mubr.f32.gmra.mxu0 %v1801
  %v2157 = vpop.f32.mrf.mxu0
  %v2158 = vadd.f32 0.0, %v2157
  %v2159 = vpop.f32.mrf.mxu0
  %2160 = vmatprep.mubr.f32.mxu0 0.0
  %2161 = vmatmul.mubr.f32.gmra.mxu0 %v1804
  %v2162 = vpop.f32.mrf.mxu0
  %v2163 = vadd.f32 0.0, %v2162
  %v2164 = vpop.f32.mrf.mxu0
  %2165 = vmatprep.mubr.f32.mxu0 0.0
  %2166 = vmatmul.mubr.f32.gmra.mxu0 %v1807
  %v2167 = vpop.f32.mrf.mxu0
  %v2168 = vadd.f32 0.0, %v2167
  %v2169 = vpop.f32.mrf.mxu0
  %2170 = vmatprep.mubr.f32.mxu0 0.0
  %2171 = vmatmul.mubr.f32.gmra.mxu0 %v1810
  %v2172 = vpop.f32.mrf.mxu0
  %v2173 = vadd.f32 0.0, %v2172
  %v2174 = vpop.f32.mrf.mxu0
  %2175 = vmatprep.mubr.f32.mxu0 0.0
  %2176 = vmatmul.mubr.f32.gmra.mxu0 %v1813
  %v2177 = vpop.f32.mrf.mxu0
  %v2178 = vadd.f32 0.0, %v2177
  %v2179 = vpop.f32.mrf.mxu0
  %2180 = vmatprep.mubr.f32.mxu0 0.0
  %2181 = vmatmul.mubr.f32.gmra.mxu0 %v1816
  %v2182 = vpop.f32.mrf.mxu0
  %v2183 = vadd.f32 0.0, %v2182
  %v2184 = vpop.f32.mrf.mxu0
  %2185 = vmatprep.mubr.f32.mxu0 0.0
  %2186 = vmatmul.mubr.f32.gmra.mxu0 %v1819
  %v2187 = vpop.f32.mrf.mxu0
  %v2188 = vadd.f32 0.0, %v2187
  %v2189 = vpop.f32.mrf.mxu0
  %2190 = vmatprep.mubr.f32.mxu0 0.0
  %2191 = vmatmul.mubr.f32.gmra.mxu0 %v1822
  %v2192 = vpop.f32.mrf.mxu0
  %v2193 = vadd.f32 0.0, %v2192
  %v2194 = vpop.f32.mrf.mxu0
  %2195 = vmatprep.mubr.f32.mxu0 0.0
  %2196 = vmatmul.mubr.f32.gmra.mxu0 %v1825
  %v2197 = vpop.f32.mrf.mxu0
  %v2198 = vadd.f32 0.0, %v2197
  %v2199 = vpop.f32.mrf.mxu0
  %2200 = vmatprep.mubr.f32.mxu0 0.0
  %2201 = vmatmul.mubr.f32.gmra.mxu0 %v1828
  %v2202 = vpop.f32.mrf.mxu0
  %v2203 = vadd.f32 0.0, %v2202
  %v2204 = vpop.f32.mrf.mxu0
  %2205 = vmatprep.mubr.f32.mxu0 0.0
  %2206 = vmatmul.mubr.f32.gmra.mxu0 %v1831
  %v2207 = vpop.f32.mrf.mxu0
  %v2208 = vadd.f32 0.0, %v2207
  %v2209 = vpop.f32.mrf.mxu0
  %2210 = vmatprep.mubr.f32.mxu0 0.0
  %2211 = vmatmul.mubr.f32.gmra.mxu0 %v1834
  %v2212 = vpop.f32.mrf.mxu0
  %v2213 = vadd.f32 0.0, %v2212
  %v2214 = vpop.f32.mrf.mxu0
  %2215 = vmatprep.mubr.f32.mxu0 0.0
  %2216 = vmatmul.mubr.f32.gmra.mxu0 %v1837
  %v2217 = vpop.f32.mrf.mxu0
  %v2218 = vadd.f32 0.0, %v2217
  %v2219 = vpop.f32.mrf.mxu0
  %2220 = vmatprep.mubr.f32.mxu0 0.0
  %2221 = vmatmul.mubr.f32.gmra.mxu0 %v1840
  %v2222 = vpop.f32.mrf.mxu0
  %v2223 = vadd.f32 0.0, %v2222
  %v2224 = vpop.f32.mrf.mxu0
  %2225 = vmatprep.mubr.f32.mxu0 0.0
  %2226 = vmatmul.mubr.f32.gmra.mxu0 %v1843
  %v2227 = vpop.f32.mrf.mxu0
  %v2228 = vadd.f32 0.0, %v2227
  %v2229 = vpop.f32.mrf.mxu0
  %2230 = vmatprep.mubr.f32.mxu0 0.0
  %2231 = vmatmul.mubr.f32.gmra.mxu0 %v1846
  %v2232 = vpop.f32.mrf.mxu0
  %v2233 = vadd.f32 0.0, %v2232
  %v2234 = vpop.f32.mrf.mxu0
  %2235 = vdwg.mxu0
  %v2236 = vadd.f32 %v1272, %v1918
  %v2237 = vadd.f32 %v1277, %v1923
  %v2238 = vadd.f32 %v1282, %v1928
  %v2239 = vadd.f32 %v1287, %v1933
  %v2240 = vadd.f32 %v1292, %v1938
  %v2241 = vadd.f32 %v1297, %v1943
  %v2242 = vadd.f32 %v1302, %v1948
  %v2243 = vadd.f32 %v1307, %v1953
  %v2244 = vadd.f32 %v1312, %v1958
  %v2245 = vadd.f32 %v1317, %v1963
  %v2246 = vadd.f32 %v1322, %v1968
  %v2247 = vadd.f32 %v1327, %v1973
  %v2248 = vadd.f32 %v1332, %v1978
  %v2249 = vadd.f32 %v1337, %v1983
  %v2250 = vadd.f32 %v1342, %v1988
  %v2251 = vadd.f32 %v1347, %v1993
  %v2252 = vadd.f32 %v1352, %v1998
  %v2253 = vadd.f32 %v1357, %v2003
  %v2254 = vadd.f32 %v1362, %v2008
  %v2255 = vadd.f32 %v1367, %v2013
  %v2256 = vadd.f32 %v1372, %v2018
  %v2257 = vadd.f32 %v1377, %v2023
  %v2258 = vadd.f32 %v1382, %v2028
  %v2259 = vadd.f32 %v1387, %v2033
  %v2260 = vadd.f32 %v1392, %v2038
  %v2261 = vadd.f32 %v1397, %v2043
  %v2262 = vadd.f32 %v1402, %v2048
  %v2263 = vadd.f32 %v1407, %v2053
  %v2264 = vadd.f32 %v1412, %v2058
  %v2265 = vadd.f32 %v1417, %v2063
  %v2266 = vadd.f32 %v1422, %v2068
  %v2267 = vadd.f32 %v1427, %v2073
  %v2268 = vadd.f32 %v1432, %v2078
  %v2269 = vadd.f32 %v1437, %v2083
  %v2270 = vadd.f32 %v1442, %v2088
  %v2271 = vadd.f32 %v1447, %v2093
  %v2272 = vadd.f32 %v1452, %v2098
  %v2273 = vadd.f32 %v1457, %v2103
  %v2274 = vadd.f32 %v1462, %v2108
  %v2275 = vadd.f32 %v1467, %v2113
  %v2276 = vadd.f32 %v1472, %v2118
  %v2277 = vadd.f32 %v1477, %v2123
  %v2278 = vadd.f32 %v1482, %v2128
  %v2279 = vadd.f32 %v1487, %v2133
  %v2280 = vadd.f32 %v1492, %v2138
  %v2281 = vadd.f32 %v1497, %v2143
  %v2282 = vadd.f32 %v1502, %v2148
  %v2283 = vadd.f32 %v1507, %v2153
  %v2284 = vadd.f32 %v1512, %v2158
  %v2285 = vadd.f32 %v1517, %v2163
  %v2286 = vadd.f32 %v1522, %v2168
  %v2287 = vadd.f32 %v1527, %v2173
  %v2288 = vadd.f32 %v1532, %v2178
  %v2289 = vadd.f32 %v1537, %v2183
  %v2290 = vadd.f32 %v1542, %v2188
  %v2291 = vadd.f32 %v1547, %v2193
  %v2292 = vadd.f32 %v1552, %v2198
  %v2293 = vadd.f32 %v1557, %v2203
  %v2294 = vadd.f32 %v1562, %v2208
  %v2295 = vadd.f32 %v1567, %v2213
  %v2296 = vadd.f32 %v1572, %v2218
  %v2297 = vadd.f32 %v1577, %v2223
  %v2298 = vadd.f32 %v1582, %v2228
  %v2299 = vadd.f32 %v1587, %v2233
  %v2300 = vld [vmem:[%s78] sm:$0xff]
  %v2301 = vld [vmem:[%s78 + $0x8] sm:$0xff]
  %v2302 = vld [vmem:[%s78 + $0x18] sm:$0xff]
  %v2303 = vld [vmem:[%s78 + $0x20] sm:$0xff]
  %v2304 = vld [vmem:[%s78 + $0x30] sm:$0xff]
  %v2305 = vld [vmem:[%s78 + $0x38] sm:$0xff]
  %v2306 = vld [vmem:[%s78 + $0x48] sm:$0xff]
  %v2307 = vld [vmem:[%s78 + $0x50] sm:$0xff]
  %v2308 = vld [vmem:[%s78 + $0x60] sm:$0xff]
  %v2309 = vld [vmem:[%s78 + $0x68] sm:$0xff]
  %v2310 = vld [vmem:[%s78 + $0x78] sm:$0xff]
  %v2311 = vld [vmem:[%s78 + $0x80] sm:$0xff]
  %v2312 = vld [vmem:[%s78 + $0x90] sm:$0xff]
  %v2313 = vld [vmem:[%s78 + $0x98] sm:$0xff]
  %v2314 = vld [vmem:[%s78 + $0xa8] sm:$0xff]
  %v2315 = vld [vmem:[%s78 + $0xb0] sm:$0xff]
  %v2316 = vld [vmem:[%s78 + $0xc0] sm:$0xff]
  %v2317 = vld [vmem:[%s78 + $0xc8] sm:$0xff]
  %v2318 = vld [vmem:[%s78 + $0xd8] sm:$0xff]
  %v2319 = vld [vmem:[%s78 + $0xe0] sm:$0xff]
  %v2320 = vld [vmem:[%s78 + $0xf0] sm:$0xff]
  %v2321 = vld [vmem:[%s78 + $0xf8] sm:$0xff]
  %v2322 = vld [vmem:[%s78 + $0x108] sm:$0xff]
  %v2323 = vld [vmem:[%s78 + $0x110] sm:$0xff]
  %v2324 = vld [vmem:[%s78 + $0x120] sm:$0xff]
  %v2325 = vld [vmem:[%s78 + $0x128] sm:$0xff]
  %v2326 = vld [vmem:[%s78 + $0x138] sm:$0xff]
  %v2327 = vld [vmem:[%s78 + $0x140] sm:$0xff]
  %v2328 = vld [vmem:[%s78 + $0x150] sm:$0xff]
  %v2329 = vld [vmem:[%s78 + $0x158] sm:$0xff]
  %v2330 = vld [vmem:[%s78 + $0x168] sm:$0xff]
  %v2331 = vld [vmem:[%s78 + $0x170] sm:$0xff]
  %v2332 = vld [vmem:[%s78 + $0x1b0] sm:$0xff]
  %v2333 = vld [vmem:[%s78 + $0x1b8] sm:$0xff]
  %v2334 = vld [vmem:[%s78 + $0x1c8] sm:$0xff]
  %v2335 = vld [vmem:[%s78 + $0x1d0] sm:$0xff]
  %v2336 = vld [vmem:[%s78 + $0x1e0] sm:$0xff]
  %v2337 = vld [vmem:[%s78 + $0x1e8] sm:$0xff]
  %v2338 = vld [vmem:[%s78 + $0x1f8] sm:$0xff]
  %v2339 = vld [vmem:[%s78 + $0x200] sm:$0xff]
  %v2340 = vld [vmem:[%s78 + $0x210] sm:$0xff]
  %v2341 = vld [vmem:[%s78 + $0x218] sm:$0xff]
  %v2342 = vld [vmem:[%s78 + $0x228] sm:$0xff]
  %v2343 = vld [vmem:[%s78 + $0x230] sm:$0xff]
  %v2344 = vld [vmem:[%s78 + $0x240] sm:$0xff]
  %v2345 = vld [vmem:[%s78 + $0x248] sm:$0xff]
  %v2346 = vld [vmem:[%s78 + $0x258] sm:$0xff]
  %v2347 = vld [vmem:[%s78 + $0x260] sm:$0xff]
  %v2348 = vld [vmem:[%s78 + $0x270] sm:$0xff]
  %v2349 = vld [vmem:[%s78 + $0x278] sm:$0xff]
  %v2350 = vld [vmem:[%s78 + $0x288] sm:$0xff]
  %v2351 = vld [vmem:[%s78 + $0x290] sm:$0xff]
  %v2352 = vld [vmem:[%s78 + $0x2a0] sm:$0xff]
  %v2353 = vld [vmem:[%s78 + $0x2a8] sm:$0xff]
  %v2354 = vld [vmem:[%s78 + $0x2b8] sm:$0xff]
  %v2355 = vld [vmem:[%s78 + $0x2c0] sm:$0xff]
  %v2356 = vld [vmem:[%s78 + $0x2d0] sm:$0xff]
  %v2357 = vld [vmem:[%s78 + $0x2d8] sm:$0xff]
  %v2358 = vld [vmem:[%s78 + $0x2e8] sm:$0xff]
  %v2359 = vld [vmem:[%s78 + $0x2f0] sm:$0xff]
  %v2360 = vld [vmem:[%s78 + $0x300] sm:$0xff]
  %v2361 = vld [vmem:[%s78 + $0x308] sm:$0xff]
  %v2362 = vld [vmem:[%s78 + $0x318] sm:$0xff]
  %v2363 = vld [vmem:[%s78 + $0x320] sm:$0xff]
  %s2364 = scalar_lea.vmem %s1, 12
  %v2365 = vld [vmem:[%s2364] sm:$0xf]
  %v2367 = vsel %vm79, %v2300, 0
  %v2370 = vsel %vm79, %v2301, 0
  %v2373 = vsel %vm79, %v2302, 0
  %v2376 = vsel %vm79, %v2303, 0
  %v2379 = vsel %vm79, %v2304, 0
  %v2382 = vsel %vm79, %v2305, 0
  %v2385 = vsel %vm79, %v2306, 0
  %v2388 = vsel %vm79, %v2307, 0
  %v2391 = vsel %vm79, %v2308, 0
  %v2394 = vsel %vm79, %v2309, 0
  %v2397 = vsel %vm79, %v2310, 0
  %v2400 = vsel %vm79, %v2311, 0
  %v2403 = vsel %vm79, %v2312, 0
  %v2406 = vsel %vm79, %v2313, 0
  %v2409 = vsel %vm79, %v2314, 0
  %v2412 = vsel %vm79, %v2315, 0
  %v2415 = vsel %vm79, %v2316, 0
  %v2418 = vsel %vm79, %v2317, 0
  %v2421 = vsel %vm79, %v2318, 0
  %v2424 = vsel %vm79, %v2319, 0
  %v2427 = vsel %vm79, %v2320, 0
  %v2430 = vsel %vm79, %v2321, 0
  %v2433 = vsel %vm79, %v2322, 0
  %v2436 = vsel %vm79, %v2323, 0
  %v2439 = vsel %vm79, %v2324, 0
  %v2442 = vsel %vm79, %v2325, 0
  %v2445 = vsel %vm79, %v2326, 0
  %v2448 = vsel %vm79, %v2327, 0
  %v2451 = vsel %vm79, %v2328, 0
  %v2454 = vsel %vm79, %v2329, 0
  %v2457 = vsel %vm79, %v2330, 0
  %v2460 = vsel %vm79, %v2331, 0
  %v2463 = vsel %vm79, %v2332, 0
  %v2466 = vsel %vm79, %v2333, 0
  %v2469 = vsel %vm79, %v2334, 0
  %v2472 = vsel %vm79, %v2335, 0
  %v2475 = vsel %vm79, %v2336, 0
  %v2478 = vsel %vm79, %v2337, 0
  %v2481 = vsel %vm79, %v2338, 0
  %v2484 = vsel %vm79, %v2339, 0
  %v2487 = vsel %vm79, %v2340, 0
  %v2490 = vsel %vm79, %v2341, 0
  %v2493 = vsel %vm79, %v2342, 0
  %v2496 = vsel %vm79, %v2343, 0
  %v2499 = vsel %vm79, %v2344, 0
  %v2502 = vsel %vm79, %v2345, 0
  %v2505 = vsel %vm79, %v2346, 0
  %v2508 = vsel %vm79, %v2347, 0
  %v2511 = vsel %vm79, %v2348, 0
  %v2514 = vsel %vm79, %v2349, 0
  %v2517 = vsel %vm79, %v2350, 0
  %v2520 = vsel %vm79, %v2351, 0
  %v2523 = vsel %vm79, %v2352, 0
  %v2526 = vsel %vm79, %v2353, 0
  %v2529 = vsel %vm79, %v2354, 0
  %v2532 = vsel %vm79, %v2355, 0
  %v2535 = vsel %vm79, %v2356, 0
  %v2538 = vsel %vm79, %v2357, 0
  %v2541 = vsel %vm79, %v2358, 0
  %v2544 = vsel %vm79, %v2359, 0
  %v2547 = vsel %vm79, %v2360, 0
  %v2550 = vsel %vm79, %v2361, 0
  %v2553 = vsel %vm79, %v2362, 0
  %v2556 = vsel %vm79, %v2363, 0
  %v2559 = vsel %vm621, %v2365, 0
  %2561 = vmatprep.subr.mxu0 0.0
  %2562 = vmatpush1.msra.mxu0 0.0
  %2563 = vmatprep.subr.mxu0 0.0
  %2564 = vmatpush1.msra.mxu0 0.0
  %2565 = vmatprep.subr.mxu0 0.0
  %2566 = vmatpush1.msra.mxu0 0.0
  %2567 = vmatprep.subr.mxu0 0.0
  %2568 = vmatpush1.msra.mxu0 0.0
  %2569 = vmatprep.subr.mxu0 0.0
  %2570 = vmatpush1.msra.mxu0 0.0
  %2571 = vmatprep.subr.mxu0 0.0
  %2572 = vmatpush1.msra.mxu0 0.0
  %2573 = vmatprep.subr.mxu0 0.0
  %2574 = vmatpush1.msra.mxu0 0.0
  %2575 = vmatprep.subr.mxu0 0.0
  %2576 = vmatpush1.msra.mxu0 0.0
  %2577 = vmatprep.subr.mxu0 0.0
  %2578 = vmatpush1.msra.mxu0 0.0
  %2579 = vmatprep.subr.mxu0 0.0
  %2580 = vmatpush1.msra.mxu0 0.0
  %2581 = vmatprep.subr.mxu0 0.0
  %2582 = vmatpush1.msra.mxu0 0.0
  %2583 = vmatprep.subr.mxu0 0.0
  %2584 = vmatpush1.msra.mxu0 0.0
  %2585 = vmatprep.subr.mxu0 0.0
  %2586 = vmatpush1.msra.mxu0 0.0
  %2587 = vmatprep.subr.mxu0 0.0
  %2588 = vmatpush1.msra.mxu0 0.0
  %2589 = vmatprep.subr.mxu0 0.0
  %2590 = vmatpush1.msra.mxu0 0.0
  %2591 = vmatprep.subr.mxu0 0.0
  %2592 = vmatpush1.msra.mxu0 %v2559
  %2593 = vmatprep.subr.mxu0 0.0
  %2594 = vmatpush2.msra.mxu0 0.0
  %2595 = vmatprep.subr.mxu0 0.0
  %2596 = vmatpush2.msra.mxu0 0.0
  %2597 = vmatprep.subr.mxu0 0.0
  %2598 = vmatpush2.msra.mxu0 0.0
  %2599 = vmatprep.subr.mxu0 0.0
  %2600 = vmatpush2.msra.mxu0 0.0
  %2601 = vmatprep.subr.mxu0 0.0
  %2602 = vmatpush2.msra.mxu0 0.0
  %2603 = vmatprep.subr.mxu0 0.0
  %2604 = vmatpush2.msra.mxu0 0.0
  %2605 = vmatprep.subr.mxu0 0.0
  %2606 = vmatpush2.msra.mxu0 0.0
  %2607 = vmatprep.subr.mxu0 0.0
  %2608 = vmatpush2.msra.mxu0 0.0
  %2609 = vmatprep.subr.mxu0 0.0
  %2610 = vmatpush2.msra.mxu0 0.0
  %2611 = vmatprep.subr.mxu0 0.0
  %2612 = vmatpush2.msra.mxu0 0.0
  %2613 = vmatprep.subr.mxu0 0.0
  %2614 = vmatpush2.msra.mxu0 0.0
  %2615 = vmatprep.subr.mxu0 0.0
  %2616 = vmatpush2.msra.mxu0 0.0
  %2617 = vmatprep.subr.mxu0 0.0
  %2618 = vmatpush2.msra.mxu0 0.0
  %2619 = vmatprep.subr.mxu0 0.0
  %2620 = vmatpush2.msra.mxu0 0.0
  %2621 = vmatprep.subr.mxu0 0.0
  %2622 = vmatpush2.msra.mxu0 0.0
  %2623 = vmatprep.subr.mxu0 0.0
  %2624 = vmatpush2.msra.mxu0 0.0
  %2625 = vmatprep.mubr.f32.mxu0 0.0
  %2626 = vmatmul.mubr.f32.gmra.mxu0 %v2367
  %v2627 = vpop.f32.mrf.mxu0
  %v2628 = vadd.f32 0.0, %v2627
  %v2629 = vpop.f32.mrf.mxu0
  %2630 = vmatprep.mubr.f32.mxu0 0.0
  %2631 = vmatmul.mubr.f32.gmra.mxu0 %v2370
  %v2632 = vpop.f32.mrf.mxu0
  %v2633 = vadd.f32 0.0, %v2632
  %v2634 = vpop.f32.mrf.mxu0
  %2635 = vmatprep.mubr.f32.mxu0 0.0
  %2636 = vmatmul.mubr.f32.gmra.mxu0 %v2373
  %v2637 = vpop.f32.mrf.mxu0
  %v2638 = vadd.f32 0.0, %v2637
  %v2639 = vpop.f32.mrf.mxu0
  %2640 = vmatprep.mubr.f32.mxu0 0.0
  %2641 = vmatmul.mubr.f32.gmra.mxu0 %v2376
  %v2642 = vpop.f32.mrf.mxu0
  %v2643 = vadd.f32 0.0, %v2642
  %v2644 = vpop.f32.mrf.mxu0
  %2645 = vmatprep.mubr.f32.mxu0 0.0
  %2646 = vmatmul.mubr.f32.gmra.mxu0 %v2379
  %v2647 = vpop.f32.mrf.mxu0
  %v2648 = vadd.f32 0.0, %v2647
  %v2649 = vpop.f32.mrf.mxu0
  %2650 = vmatprep.mubr.f32.mxu0 0.0
  %2651 = vmatmul.mubr.f32.gmra.mxu0 %v2382
  %v2652 = vpop.f32.mrf.mxu0
  %v2653 = vadd.f32 0.0, %v2652
  %v2654 = vpop.f32.mrf.mxu0
  %2655 = vmatprep.mubr.f32.mxu0 0.0
  %2656 = vmatmul.mubr.f32.gmra.mxu0 %v2385
  %v2657 = vpop.f32.mrf.mxu0
  %v2658 = vadd.f32 0.0, %v2657
  %v2659 = vpop.f32.mrf.mxu0
  %2660 = vmatprep.mubr.f32.mxu0 0.0
  %2661 = vmatmul.mubr.f32.gmra.mxu0 %v2388
  %v2662 = vpop.f32.mrf.mxu0
  %v2663 = vadd.f32 0.0, %v2662
  %v2664 = vpop.f32.mrf.mxu0
  %2665 = vmatprep.mubr.f32.mxu0 0.0
  %2666 = vmatmul.mubr.f32.gmra.mxu0 %v2391
  %v2667 = vpop.f32.mrf.mxu0
  %v2668 = vadd.f32 0.0, %v2667
  %v2669 = vpop.f32.mrf.mxu0
  %2670 = vmatprep.mubr.f32.mxu0 0.0
  %2671 = vmatmul.mubr.f32.gmra.mxu0 %v2394
  %v2672 = vpop.f32.mrf.mxu0
  %v2673 = vadd.f32 0.0, %v2672
  %v2674 = vpop.f32.mrf.mxu0
  %2675 = vmatprep.mubr.f32.mxu0 0.0
  %2676 = vmatmul.mubr.f32.gmra.mxu0 %v2397
  %v2677 = vpop.f32.mrf.mxu0
  %v2678 = vadd.f32 0.0, %v2677
  %v2679 = vpop.f32.mrf.mxu0
  %2680 = vmatprep.mubr.f32.mxu0 0.0
  %2681 = vmatmul.mubr.f32.gmra.mxu0 %v2400
  %v2682 = vpop.f32.mrf.mxu0
  %v2683 = vadd.f32 0.0, %v2682
  %v2684 = vpop.f32.mrf.mxu0
  %2685 = vmatprep.mubr.f32.mxu0 0.0
  %2686 = vmatmul.mubr.f32.gmra.mxu0 %v2403
  %v2687 = vpop.f32.mrf.mxu0
  %v2688 = vadd.f32 0.0, %v2687
  %v2689 = vpop.f32.mrf.mxu0
  %2690 = vmatprep.mubr.f32.mxu0 0.0
  %2691 = vmatmul.mubr.f32.gmra.mxu0 %v2406
  %v2692 = vpop.f32.mrf.mxu0
  %v2693 = vadd.f32 0.0, %v2692
  %v2694 = vpop.f32.mrf.mxu0
  %2695 = vmatprep.mubr.f32.mxu0 0.0
  %2696 = vmatmul.mubr.f32.gmra.mxu0 %v2409
  %v2697 = vpop.f32.mrf.mxu0
  %v2698 = vadd.f32 0.0, %v2697
  %v2699 = vpop.f32.mrf.mxu0
  %2700 = vmatprep.mubr.f32.mxu0 0.0
  %2701 = vmatmul.mubr.f32.gmra.mxu0 %v2412
  %v2702 = vpop.f32.mrf.mxu0
  %v2703 = vadd.f32 0.0, %v2702
  %v2704 = vpop.f32.mrf.mxu0
  %2705 = vmatprep.mubr.f32.mxu0 0.0
  %2706 = vmatmul.mubr.f32.gmra.mxu0 %v2415
  %v2707 = vpop.f32.mrf.mxu0
  %v2708 = vadd.f32 0.0, %v2707
  %v2709 = vpop.f32.mrf.mxu0
  %2710 = vmatprep.mubr.f32.mxu0 0.0
  %2711 = vmatmul.mubr.f32.gmra.mxu0 %v2418
  %v2712 = vpop.f32.mrf.mxu0
  %v2713 = vadd.f32 0.0, %v2712
  %v2714 = vpop.f32.mrf.mxu0
  %2715 = vmatprep.mubr.f32.mxu0 0.0
  %2716 = vmatmul.mubr.f32.gmra.mxu0 %v2421
  %v2717 = vpop.f32.mrf.mxu0
  %v2718 = vadd.f32 0.0, %v2717
  %v2719 = vpop.f32.mrf.mxu0
  %2720 = vmatprep.mubr.f32.mxu0 0.0
  %2721 = vmatmul.mubr.f32.gmra.mxu0 %v2424
  %v2722 = vpop.f32.mrf.mxu0
  %v2723 = vadd.f32 0.0, %v2722
  %v2724 = vpop.f32.mrf.mxu0
  %2725 = vmatprep.mubr.f32.mxu0 0.0
  %2726 = vmatmul.mubr.f32.gmra.mxu0 %v2427
  %v2727 = vpop.f32.mrf.mxu0
  %v2728 = vadd.f32 0.0, %v2727
  %v2729 = vpop.f32.mrf.mxu0
  %2730 = vmatprep.mubr.f32.mxu0 0.0
  %2731 = vmatmul.mubr.f32.gmra.mxu0 %v2430
  %v2732 = vpop.f32.mrf.mxu0
  %v2733 = vadd.f32 0.0, %v2732
  %v2734 = vpop.f32.mrf.mxu0
  %2735 = vmatprep.mubr.f32.mxu0 0.0
  %2736 = vmatmul.mubr.f32.gmra.mxu0 %v2433
  %v2737 = vpop.f32.mrf.mxu0
  %v2738 = vadd.f32 0.0, %v2737
  %v2739 = vpop.f32.mrf.mxu0
  %2740 = vmatprep.mubr.f32.mxu0 0.0
  %2741 = vmatmul.mubr.f32.gmra.mxu0 %v2436
  %v2742 = vpop.f32.mrf.mxu0
  %v2743 = vadd.f32 0.0, %v2742
  %v2744 = vpop.f32.mrf.mxu0
  %2745 = vmatprep.mubr.f32.mxu0 0.0
  %2746 = vmatmul.mubr.f32.gmra.mxu0 %v2439
  %v2747 = vpop.f32.mrf.mxu0
  %v2748 = vadd.f32 0.0, %v2747
  %v2749 = vpop.f32.mrf.mxu0
  %2750 = vmatprep.mubr.f32.mxu0 0.0
  %2751 = vmatmul.mubr.f32.gmra.mxu0 %v2442
  %v2752 = vpop.f32.mrf.mxu0
  %v2753 = vadd.f32 0.0, %v2752
  %v2754 = vpop.f32.mrf.mxu0
  %2755 = vmatprep.mubr.f32.mxu0 0.0
  %2756 = vmatmul.mubr.f32.gmra.mxu0 %v2445
  %v2757 = vpop.f32.mrf.mxu0
  %v2758 = vadd.f32 0.0, %v2757
  %v2759 = vpop.f32.mrf.mxu0
  %2760 = vmatprep.mubr.f32.mxu0 0.0
  %2761 = vmatmul.mubr.f32.gmra.mxu0 %v2448
  %v2762 = vpop.f32.mrf.mxu0
  %v2763 = vadd.f32 0.0, %v2762
  %v2764 = vpop.f32.mrf.mxu0
  %2765 = vmatprep.mubr.f32.mxu0 0.0
  %2766 = vmatmul.mubr.f32.gmra.mxu0 %v2451
  %v2767 = vpop.f32.mrf.mxu0
  %v2768 = vadd.f32 0.0, %v2767
  %v2769 = vpop.f32.mrf.mxu0
  %2770 = vmatprep.mubr.f32.mxu0 0.0
  %2771 = vmatmul.mubr.f32.gmra.mxu0 %v2454
  %v2772 = vpop.f32.mrf.mxu0
  %v2773 = vadd.f32 0.0, %v2772
  %v2774 = vpop.f32.mrf.mxu0
  %2775 = vmatprep.mubr.f32.mxu0 0.0
  %2776 = vmatmul.mubr.f32.gmra.mxu0 %v2457
  %v2777 = vpop.f32.mrf.mxu0
  %v2778 = vadd.f32 0.0, %v2777
  %v2779 = vpop.f32.mrf.mxu0
  %2780 = vmatprep.mubr.f32.mxu0 0.0
  %2781 = vmatmul.mubr.f32.gmra.mxu0 %v2460
  %v2782 = vpop.f32.mrf.mxu0
  %v2783 = vadd.f32 0.0, %v2782
  %v2784 = vpop.f32.mrf.mxu0
  %2785 = vmatprep.mubr.f32.mxu0 0.0
  %2786 = vmatmul.mubr.f32.gmra.mxu0 %v2463
  %v2787 = vpop.f32.mrf.mxu0
  %v2788 = vadd.f32 0.0, %v2787
  %v2789 = vpop.f32.mrf.mxu0
  %2790 = vmatprep.mubr.f32.mxu0 0.0
  %2791 = vmatmul.mubr.f32.gmra.mxu0 %v2466
  %v2792 = vpop.f32.mrf.mxu0
  %v2793 = vadd.f32 0.0, %v2792
  %v2794 = vpop.f32.mrf.mxu0
  %2795 = vmatprep.mubr.f32.mxu0 0.0
  %2796 = vmatmul.mubr.f32.gmra.mxu0 %v2469
  %v2797 = vpop.f32.mrf.mxu0
  %v2798 = vadd.f32 0.0, %v2797
  %v2799 = vpop.f32.mrf.mxu0
  %2800 = vmatprep.mubr.f32.mxu0 0.0
  %2801 = vmatmul.mubr.f32.gmra.mxu0 %v2472
  %v2802 = vpop.f32.mrf.mxu0
  %v2803 = vadd.f32 0.0, %v2802
  %v2804 = vpop.f32.mrf.mxu0
  %2805 = vmatprep.mubr.f32.mxu0 0.0
  %2806 = vmatmul.mubr.f32.gmra.mxu0 %v2475
  %v2807 = vpop.f32.mrf.mxu0
  %v2808 = vadd.f32 0.0, %v2807
  %v2809 = vpop.f32.mrf.mxu0
  %2810 = vmatprep.mubr.f32.mxu0 0.0
  %2811 = vmatmul.mubr.f32.gmra.mxu0 %v2478
  %v2812 = vpop.f32.mrf.mxu0
  %v2813 = vadd.f32 0.0, %v2812
  %v2814 = vpop.f32.mrf.mxu0
  %2815 = vmatprep.mubr.f32.mxu0 0.0
  %2816 = vmatmul.mubr.f32.gmra.mxu0 %v2481
  %v2817 = vpop.f32.mrf.mxu0
  %v2818 = vadd.f32 0.0, %v2817
  %v2819 = vpop.f32.mrf.mxu0
  %2820 = vmatprep.mubr.f32.mxu0 0.0
  %2821 = vmatmul.mubr.f32.gmra.mxu0 %v2484
  %v2822 = vpop.f32.mrf.mxu0
  %v2823 = vadd.f32 0.0, %v2822
  %v2824 = vpop.f32.mrf.mxu0
  %2825 = vmatprep.mubr.f32.mxu0 0.0
  %2826 = vmatmul.mubr.f32.gmra.mxu0 %v2487
  %v2827 = vpop.f32.mrf.mxu0
  %v2828 = vadd.f32 0.0, %v2827
  %v2829 = vpop.f32.mrf.mxu0
  %2830 = vmatprep.mubr.f32.mxu0 0.0
  %2831 = vmatmul.mubr.f32.gmra.mxu0 %v2490
  %v2832 = vpop.f32.mrf.mxu0
  %v2833 = vadd.f32 0.0, %v2832
  %v2834 = vpop.f32.mrf.mxu0
  %2835 = vmatprep.mubr.f32.mxu0 0.0
  %2836 = vmatmul.mubr.f32.gmra.mxu0 %v2493
  %v2837 = vpop.f32.mrf.mxu0
  %v2838 = vadd.f32 0.0, %v2837
  %v2839 = vpop.f32.mrf.mxu0
  %2840 = vmatprep.mubr.f32.mxu0 0.0
  %2841 = vmatmul.mubr.f32.gmra.mxu0 %v2496
  %v2842 = vpop.f32.mrf.mxu0
  %v2843 = vadd.f32 0.0, %v2842
  %v2844 = vpop.f32.mrf.mxu0
  %2845 = vmatprep.mubr.f32.mxu0 0.0
  %2846 = vmatmul.mubr.f32.gmra.mxu0 %v2499
  %v2847 = vpop.f32.mrf.mxu0
  %v2848 = vadd.f32 0.0, %v2847
  %v2849 = vpop.f32.mrf.mxu0
  %2850 = vmatprep.mubr.f32.mxu0 0.0
  %2851 = vmatmul.mubr.f32.gmra.mxu0 %v2502
  %v2852 = vpop.f32.mrf.mxu0
  %v2853 = vadd.f32 0.0, %v2852
  %v2854 = vpop.f32.mrf.mxu0
  %2855 = vmatprep.mubr.f32.mxu0 0.0
  %2856 = vmatmul.mubr.f32.gmra.mxu0 %v2505
  %v2857 = vpop.f32.mrf.mxu0
  %v2858 = vadd.f32 0.0, %v2857
  %v2859 = vpop.f32.mrf.mxu0
  %2860 = vmatprep.mubr.f32.mxu0 0.0
  %2861 = vmatmul.mubr.f32.gmra.mxu0 %v2508
  %v2862 = vpop.f32.mrf.mxu0
  %v2863 = vadd.f32 0.0, %v2862
  %v2864 = vpop.f32.mrf.mxu0
  %2865 = vmatprep.mubr.f32.mxu0 0.0
  %2866 = vmatmul.mubr.f32.gmra.mxu0 %v2511
  %v2867 = vpop.f32.mrf.mxu0
  %v2868 = vadd.f32 0.0, %v2867
  %v2869 = vpop.f32.mrf.mxu0
  %2870 = vmatprep.mubr.f32.mxu0 0.0
  %2871 = vmatmul.mubr.f32.gmra.mxu0 %v2514
  %v2872 = vpop.f32.mrf.mxu0
  %v2873 = vadd.f32 0.0, %v2872
  %v2874 = vpop.f32.mrf.mxu0
  %2875 = vmatprep.mubr.f32.mxu0 0.0
  %2876 = vmatmul.mubr.f32.gmra.mxu0 %v2517
  %v2877 = vpop.f32.mrf.mxu0
  %v2878 = vadd.f32 0.0, %v2877
  %v2879 = vpop.f32.mrf.mxu0
  %2880 = vmatprep.mubr.f32.mxu0 0.0
  %2881 = vmatmul.mubr.f32.gmra.mxu0 %v2520
  %v2882 = vpop.f32.mrf.mxu0
  %v2883 = vadd.f32 0.0, %v2882
  %v2884 = vpop.f32.mrf.mxu0
  %2885 = vmatprep.mubr.f32.mxu0 0.0
  %2886 = vmatmul.mubr.f32.gmra.mxu0 %v2523
  %v2887 = vpop.f32.mrf.mxu0
  %v2888 = vadd.f32 0.0, %v2887
  %v2889 = vpop.f32.mrf.mxu0
  %2890 = vmatprep.mubr.f32.mxu0 0.0
  %2891 = vmatmul.mubr.f32.gmra.mxu0 %v2526
  %v2892 = vpop.f32.mrf.mxu0
  %v2893 = vadd.f32 0.0, %v2892
  %v2894 = vpop.f32.mrf.mxu0
  %2895 = vmatprep.mubr.f32.mxu0 0.0
  %2896 = vmatmul.mubr.f32.gmra.mxu0 %v2529
  %v2897 = vpop.f32.mrf.mxu0
  %v2898 = vadd.f32 0.0, %v2897
  %v2899 = vpop.f32.mrf.mxu0
  %2900 = vmatprep.mubr.f32.mxu0 0.0
  %2901 = vmatmul.mubr.f32.gmra.mxu0 %v2532
  %v2902 = vpop.f32.mrf.mxu0
  %v2903 = vadd.f32 0.0, %v2902
  %v2904 = vpop.f32.mrf.mxu0
  %2905 = vmatprep.mubr.f32.mxu0 0.0
  %2906 = vmatmul.mubr.f32.gmra.mxu0 %v2535
  %v2907 = vpop.f32.mrf.mxu0
  %v2908 = vadd.f32 0.0, %v2907
  %v2909 = vpop.f32.mrf.mxu0
  %2910 = vmatprep.mubr.f32.mxu0 0.0
  %2911 = vmatmul.mubr.f32.gmra.mxu0 %v2538
  %v2912 = vpop.f32.mrf.mxu0
  %v2913 = vadd.f32 0.0, %v2912
  %v2914 = vpop.f32.mrf.mxu0
  %2915 = vmatprep.mubr.f32.mxu0 0.0
  %2916 = vmatmul.mubr.f32.gmra.mxu0 %v2541
  %v2917 = vpop.f32.mrf.mxu0
  %v2918 = vadd.f32 0.0, %v2917
  %v2919 = vpop.f32.mrf.mxu0
  %2920 = vmatprep.mubr.f32.mxu0 0.0
  %2921 = vmatmul.mubr.f32.gmra.mxu0 %v2544
  %v2922 = vpop.f32.mrf.mxu0
  %v2923 = vadd.f32 0.0, %v2922
  %v2924 = vpop.f32.mrf.mxu0
  %2925 = vmatprep.mubr.f32.mxu0 0.0
  %2926 = vmatmul.mubr.f32.gmra.mxu0 %v2547
  %v2927 = vpop.f32.mrf.mxu0
  %v2928 = vadd.f32 0.0, %v2927
  %v2929 = vpop.f32.mrf.mxu0
  %2930 = vmatprep.mubr.f32.mxu0 0.0
  %2931 = vmatmul.mubr.f32.gmra.mxu0 %v2550
  %v2932 = vpop.f32.mrf.mxu0
  %v2933 = vadd.f32 0.0, %v2932
  %v2934 = vpop.f32.mrf.mxu0
  %2935 = vmatprep.mubr.f32.mxu0 0.0
  %2936 = vmatmul.mubr.f32.gmra.mxu0 %v2553
  %v2937 = vpop.f32.mrf.mxu0
  %v2938 = vadd.f32 0.0, %v2937
  %v2939 = vpop.f32.mrf.mxu0
  %2940 = vmatprep.mubr.f32.mxu0 0.0
  %2941 = vmatmul.mubr.f32.gmra.mxu0 %v2556
  %v2942 = vpop.f32.mrf.mxu0
  %v2943 = vadd.f32 0.0, %v2942
  %v2944 = vpop.f32.mrf.mxu0
  %2945 = vdwg.mxu0
  %v2946 = vadd.f32 %v2236, %v2628
  %v2947 = vadd.f32 %v2237, %v2633
  %v2948 = vadd.f32 %v2238, %v2638
  %v2949 = vadd.f32 %v2239, %v2643
  %v2950 = vadd.f32 %v2240, %v2648
  %v2951 = vadd.f32 %v2241, %v2653
  %v2952 = vadd.f32 %v2242, %v2658
  %v2953 = vadd.f32 %v2243, %v2663
  %v2954 = vadd.f32 %v2244, %v2668
  %v2955 = vadd.f32 %v2245, %v2673
  %v2956 = vadd.f32 %v2246, %v2678
  %v2957 = vadd.f32 %v2247, %v2683
  %v2958 = vadd.f32 %v2248, %v2688
  %v2959 = vadd.f32 %v2249, %v2693
  %v2960 = vadd.f32 %v2250, %v2698
  %v2961 = vadd.f32 %v2251, %v2703
  %v2962 = vadd.f32 %v2252, %v2708
  %v2963 = vadd.f32 %v2253, %v2713
  %v2964 = vadd.f32 %v2254, %v2718
  %v2965 = vadd.f32 %v2255, %v2723
  %v2966 = vadd.f32 %v2256, %v2728
  %v2967 = vadd.f32 %v2257, %v2733
  %v2968 = vadd.f32 %v2258, %v2738
  %v2969 = vadd.f32 %v2259, %v2743
  %v2970 = vadd.f32 %v2260, %v2748
  %v2971 = vadd.f32 %v2261, %v2753
  %v2972 = vadd.f32 %v2262, %v2758
  %v2973 = vadd.f32 %v2263, %v2763
  %v2974 = vadd.f32 %v2264, %v2768
  %v2975 = vadd.f32 %v2265, %v2773
  %v2976 = vadd.f32 %v2266, %v2778
  %v2977 = vadd.f32 %v2267, %v2783
  %v2978 = vadd.f32 %v2268, %v2788
  %v2979 = vadd.f32 %v2269, %v2793
  %v2980 = vadd.f32 %v2270, %v2798
  %v2981 = vadd.f32 %v2271, %v2803
  %v2982 = vadd.f32 %v2272, %v2808
  %v2983 = vadd.f32 %v2273, %v2813
  %v2984 = vadd.f32 %v2274, %v2818
  %v2985 = vadd.f32 %v2275, %v2823
  %v2986 = vadd.f32 %v2276, %v2828
  %v2987 = vadd.f32 %v2277, %v2833
  %v2988 = vadd.f32 %v2278, %v2838
  %v2989 = vadd.f32 %v2279, %v2843
  %v2990 = vadd.f32 %v2280, %v2848
  %v2991 = vadd.f32 %v2281, %v2853
  %v2992 = vadd.f32 %v2282, %v2858
  %v2993 = vadd.f32 %v2283, %v2863
  %v2994 = vadd.f32 %v2284, %v2868
  %v2995 = vadd.f32 %v2285, %v2873
  %v2996 = vadd.f32 %v2286, %v2878
  %v2997 = vadd.f32 %v2287, %v2883
  %v2998 = vadd.f32 %v2288, %v2888
  %v2999 = vadd.f32 %v2289, %v2893
  %v3000 = vadd.f32 %v2290, %v2898
  %v3001 = vadd.f32 %v2291, %v2903
  %v3002 = vadd.f32 %v2292, %v2908
  %v3003 = vadd.f32 %v2293, %v2913
  %v3004 = vadd.f32 %v2294, %v2918
  %v3005 = vadd.f32 %v2295, %v2923
  %v3006 = vadd.f32 %v2296, %v2928
  %v3007 = vadd.f32 %v2297, %v2933
  %v3008 = vadd.f32 %v2298, %v2938
  %v3009 = vadd.f32 %v2299, %v2943
  %v3010 = vld [vmem:[%s78 + $0x1] sm:$0xff]
  %v3011 = vld [vmem:[%s78 + $0x9] sm:$0xff]
  %v3012 = vld [vmem:[%s78 + $0x19] sm:$0xff]
  %v3013 = vld [vmem:[%s78 + $0x21] sm:$0xff]
  %v3014 = vld [vmem:[%s78 + $0x31] sm:$0xff]
  %v3015 = vld [vmem:[%s78 + $0x39] sm:$0xff]
  %v3016 = vld [vmem:[%s78 + $0x49] sm:$0xff]
  %v3017 = vld [vmem:[%s78 + $0x51] sm:$0xff]
  %v3018 = vld [vmem:[%s78 + $0x61] sm:$0xff]
  %v3019 = vld [vmem:[%s78 + $0x69] sm:$0xff]
  %v3020 = vld [vmem:[%s78 + $0x79] sm:$0xff]
  %v3021 = vld [vmem:[%s78 + $0x81] sm:$0xff]
  %v3022 = vld [vmem:[%s78 + $0x91] sm:$0xff]
  %v3023 = vld [vmem:[%s78 + $0x99] sm:$0xff]
  %v3024 = vld [vmem:[%s78 + $0xa9] sm:$0xff]
  %v3025 = vld [vmem:[%s78 + $0xb1] sm:$0xff]
  %v3026 = vld [vmem:[%s78 + $0xc1] sm:$0xff]
  %v3027 = vld [vmem:[%s78 + $0xc9] sm:$0xff]
  %v3028 = vld [vmem:[%s78 + $0xd9] sm:$0xff]
  %v3029 = vld [vmem:[%s78 + $0xe1] sm:$0xff]
  %v3030 = vld [vmem:[%s78 + $0xf1] sm:$0xff]
  %v3031 = vld [vmem:[%s78 + $0xf9] sm:$0xff]
  %v3032 = vld [vmem:[%s78 + $0x109] sm:$0xff]
  %v3033 = vld [vmem:[%s78 + $0x111] sm:$0xff]
  %v3034 = vld [vmem:[%s78 + $0x121] sm:$0xff]
  %v3035 = vld [vmem:[%s78 + $0x129] sm:$0xff]
  %v3036 = vld [vmem:[%s78 + $0x139] sm:$0xff]
  %v3037 = vld [vmem:[%s78 + $0x141] sm:$0xff]
  %v3038 = vld [vmem:[%s78 + $0x151] sm:$0xff]
  %v3039 = vld [vmem:[%s78 + $0x159] sm:$0xff]
  %v3040 = vld [vmem:[%s78 + $0x169] sm:$0xff]
  %v3041 = vld [vmem:[%s78 + $0x171] sm:$0xff]
  %v3042 = vld [vmem:[%s78 + $0x1b1] sm:$0xff]
  %v3043 = vld [vmem:[%s78 + $0x1b9] sm:$0xff]
  %v3044 = vld [vmem:[%s78 + $0x1c9] sm:$0xff]
  %v3045 = vld [vmem:[%s78 + $0x1d1] sm:$0xff]
  %v3046 = vld [vmem:[%s78 + $0x1e1] sm:$0xff]
  %v3047 = vld [vmem:[%s78 + $0x1e9] sm:$0xff]
  %v3048 = vld [vmem:[%s78 + $0x1f9] sm:$0xff]
  %v3049 = vld [vmem:[%s78 + $0x201] sm:$0xff]
  %v3050 = vld [vmem:[%s78 + $0x211] sm:$0xff]
  %v3051 = vld [vmem:[%s78 + $0x219] sm:$0xff]
  %v3052 = vld [vmem:[%s78 + $0x229] sm:$0xff]
  %v3053 = vld [vmem:[%s78 + $0x231] sm:$0xff]
  %v3054 = vld [vmem:[%s78 + $0x241] sm:$0xff]
  %v3055 = vld [vmem:[%s78 + $0x249] sm:$0xff]
  %v3056 = vld [vmem:[%s78 + $0x259] sm:$0xff]
  %v3057 = vld [vmem:[%s78 + $0x261] sm:$0xff]
  %v3058 = vld [vmem:[%s78 + $0x271] sm:$0xff]
  %v3059 = vld [vmem:[%s78 + $0x279] sm:$0xff]
  %v3060 = vld [vmem:[%s78 + $0x289] sm:$0xff]
  %v3061 = vld [vmem:[%s78 + $0x291] sm:$0xff]
  %v3062 = vld [vmem:[%s78 + $0x2a1] sm:$0xff]
  %v3063 = vld [vmem:[%s78 + $0x2a9] sm:$0xff]
  %v3064 = vld [vmem:[%s78 + $0x2b9] sm:$0xff]
  %v3065 = vld [vmem:[%s78 + $0x2c1] sm:$0xff]
  %v3066 = vld [vmem:[%s78 + $0x2d1] sm:$0xff]
  %v3067 = vld [vmem:[%s78 + $0x2d9] sm:$0xff]
  %v3068 = vld [vmem:[%s78 + $0x2e9] sm:$0xff]
  %v3069 = vld [vmem:[%s78 + $0x2f1] sm:$0xff]
  %v3070 = vld [vmem:[%s78 + $0x301] sm:$0xff]
  %v3071 = vld [vmem:[%s78 + $0x309] sm:$0xff]
  %v3072 = vld [vmem:[%s78 + $0x319] sm:$0xff]
  %v3073 = vld [vmem:[%s78 + $0x321] sm:$0xff]
  %s3074 = scalar_lea.vmem %s1, 16
  %v3075 = vld [vmem:[%s3074] sm:$0xf]
  %v3077 = vsel %vm79, %v3010, 0
  %v3080 = vsel %vm79, %v3011, 0
  %v3083 = vsel %vm79, %v3012, 0
  %v3086 = vsel %vm79, %v3013, 0
  %v3089 = vsel %vm79, %v3014, 0
  %v3092 = vsel %vm79, %v3015, 0
  %v3095 = vsel %vm79, %v3016, 0
  %v3098 = vsel %vm79, %v3017, 0
  %v3101 = vsel %vm79, %v3018, 0
  %v3104 = vsel %vm79, %v3019, 0
  %v3107 = vsel %vm79, %v3020, 0
  %v3110 = vsel %vm79, %v3021, 0
  %v3113 = vsel %vm79, %v3022, 0
  %v3116 = vsel %vm79, %v3023, 0
  %v3119 = vsel %vm79, %v3024, 0
  %v3122 = vsel %vm79, %v3025, 0
  %v3125 = vsel %vm79, %v3026, 0
  %v3128 = vsel %vm79, %v3027, 0
  %v3131 = vsel %vm79, %v3028, 0
  %v3134 = vsel %vm79, %v3029, 0
  %v3137 = vsel %vm79, %v3030, 0
  %v3140 = vsel %vm79, %v3031, 0
  %v3143 = vsel %vm79, %v3032, 0
  %v3146 = vsel %vm79, %v3033, 0
  %v3149 = vsel %vm79, %v3034, 0
  %v3152 = vsel %vm79, %v3035, 0
  %v3155 = vsel %vm79, %v3036, 0
  %v3158 = vsel %vm79, %v3037, 0
  %v3161 = vsel %vm79, %v3038, 0
  %v3164 = vsel %vm79, %v3039, 0
  %v3167 = vsel %vm79, %v3040, 0
  %v3170 = vsel %vm79, %v3041, 0
  %v3173 = vsel %vm79, %v3042, 0
  %v3176 = vsel %vm79, %v3043, 0
  %v3179 = vsel %vm79, %v3044, 0
  %v3182 = vsel %vm79, %v3045, 0
  %v3185 = vsel %vm79, %v3046, 0
  %v3188 = vsel %vm79, %v3047, 0
  %v3191 = vsel %vm79, %v3048, 0
  %v3194 = vsel %vm79, %v3049, 0
  %v3197 = vsel %vm79, %v3050, 0
  %v3200 = vsel %vm79, %v3051, 0
  %v3203 = vsel %vm79, %v3052, 0
  %v3206 = vsel %vm79, %v3053, 0
  %v3209 = vsel %vm79, %v3054, 0
  %v3212 = vsel %vm79, %v3055, 0
  %v3215 = vsel %vm79, %v3056, 0
  %v3218 = vsel %vm79, %v3057, 0
  %v3221 = vsel %vm79, %v3058, 0
  %v3224 = vsel %vm79, %v3059, 0
  %v3227 = vsel %vm79, %v3060, 0
  %v3230 = vsel %vm79, %v3061, 0
  %v3233 = vsel %vm79, %v3062, 0
  %v3236 = vsel %vm79, %v3063, 0
  %v3239 = vsel %vm79, %v3064, 0
  %v3242 = vsel %vm79, %v3065, 0
  %v3245 = vsel %vm79, %v3066, 0
  %v3248 = vsel %vm79, %v3067, 0
  %v3251 = vsel %vm79, %v3068, 0
  %v3254 = vsel %vm79, %v3069, 0
  %v3257 = vsel %vm79, %v3070, 0
  %v3260 = vsel %vm79, %v3071, 0
  %v3263 = vsel %vm79, %v3072, 0
  %v3266 = vsel %vm79, %v3073, 0
  %v3269 = vsel %vm621, %v3075, 0
  %3271 = vmatprep.subr.mxu0 0.0
  %3272 = vmatpush1.msra.mxu0 0.0
  %3273 = vmatprep.subr.mxu0 0.0
  %3274 = vmatpush1.msra.mxu0 0.0
  %3275 = vmatprep.subr.mxu0 0.0
  %3276 = vmatpush1.msra.mxu0 0.0
  %3277 = vmatprep.subr.mxu0 0.0
  %3278 = vmatpush1.msra.mxu0 0.0
  %3279 = vmatprep.subr.mxu0 0.0
  %3280 = vmatpush1.msra.mxu0 0.0
  %3281 = vmatprep.subr.mxu0 0.0
  %3282 = vmatpush1.msra.mxu0 0.0
  %3283 = vmatprep.subr.mxu0 0.0
  %3284 = vmatpush1.msra.mxu0 0.0
  %3285 = vmatprep.subr.mxu0 0.0
  %3286 = vmatpush1.msra.mxu0 0.0
  %3287 = vmatprep.subr.mxu0 0.0
  %3288 = vmatpush1.msra.mxu0 0.0
  %3289 = vmatprep.subr.mxu0 0.0
  %3290 = vmatpush1.msra.mxu0 0.0
  %3291 = vmatprep.subr.mxu0 0.0
  %3292 = vmatpush1.msra.mxu0 0.0
  %3293 = vmatprep.subr.mxu0 0.0
  %3294 = vmatpush1.msra.mxu0 0.0
  %3295 = vmatprep.subr.mxu0 0.0
  %3296 = vmatpush1.msra.mxu0 0.0
  %3297 = vmatprep.subr.mxu0 0.0
  %3298 = vmatpush1.msra.mxu0 0.0
  %3299 = vmatprep.subr.mxu0 0.0
  %3300 = vmatpush1.msra.mxu0 0.0
  %3301 = vmatprep.subr.mxu0 0.0
  %3302 = vmatpush1.msra.mxu0 %v3269
  %3303 = vmatprep.subr.mxu0 0.0
  %3304 = vmatpush2.msra.mxu0 0.0
  %3305 = vmatprep.subr.mxu0 0.0
  %3306 = vmatpush2.msra.mxu0 0.0
  %3307 = vmatprep.subr.mxu0 0.0
  %3308 = vmatpush2.msra.mxu0 0.0
  %3309 = vmatprep.subr.mxu0 0.0
  %3310 = vmatpush2.msra.mxu0 0.0
  %3311 = vmatprep.subr.mxu0 0.0
  %3312 = vmatpush2.msra.mxu0 0.0
  %3313 = vmatprep.subr.mxu0 0.0
  %3314 = vmatpush2.msra.mxu0 0.0
  %3315 = vmatprep.subr.mxu0 0.0
  %3316 = vmatpush2.msra.mxu0 0.0
  %3317 = vmatprep.subr.mxu0 0.0
  %3318 = vmatpush2.msra.mxu0 0.0
  %3319 = vmatprep.subr.mxu0 0.0
  %3320 = vmatpush2.msra.mxu0 0.0
  %3321 = vmatprep.subr.mxu0 0.0
  %3322 = vmatpush2.msra.mxu0 0.0
  %3323 = vmatprep.subr.mxu0 0.0
  %3324 = vmatpush2.msra.mxu0 0.0
  %3325 = vmatprep.subr.mxu0 0.0
  %3326 = vmatpush2.msra.mxu0 0.0
  %3327 = vmatprep.subr.mxu0 0.0
  %3328 = vmatpush2.msra.mxu0 0.0
  %3329 = vmatprep.subr.mxu0 0.0
  %3330 = vmatpush2.msra.mxu0 0.0
  %3331 = vmatprep.subr.mxu0 0.0
  %3332 = vmatpush2.msra.mxu0 0.0
  %3333 = vmatprep.subr.mxu0 0.0
  %3334 = vmatpush2.msra.mxu0 0.0
  %3335 = vmatprep.mubr.f32.mxu0 0.0
  %3336 = vmatmul.mubr.f32.gmra.mxu0 %v3077
  %v3337 = vpop.f32.mrf.mxu0
  %v3338 = vadd.f32 0.0, %v3337
  %v3339 = vpop.f32.mrf.mxu0
  %3340 = vmatprep.mubr.f32.mxu0 0.0
  %3341 = vmatmul.mubr.f32.gmra.mxu0 %v3080
  %v3342 = vpop.f32.mrf.mxu0
  %v3343 = vadd.f32 0.0, %v3342
  %v3344 = vpop.f32.mrf.mxu0
  %3345 = vmatprep.mubr.f32.mxu0 0.0
  %3346 = vmatmul.mubr.f32.gmra.mxu0 %v3083
  %v3347 = vpop.f32.mrf.mxu0
  %v3348 = vadd.f32 0.0, %v3347
  %v3349 = vpop.f32.mrf.mxu0
  %3350 = vmatprep.mubr.f32.mxu0 0.0
  %3351 = vmatmul.mubr.f32.gmra.mxu0 %v3086
  %v3352 = vpop.f32.mrf.mxu0
  %v3353 = vadd.f32 0.0, %v3352
  %v3354 = vpop.f32.mrf.mxu0
  %3355 = vmatprep.mubr.f32.mxu0 0.0
  %3356 = vmatmul.mubr.f32.gmra.mxu0 %v3089
  %v3357 = vpop.f32.mrf.mxu0
  %v3358 = vadd.f32 0.0, %v3357
  %v3359 = vpop.f32.mrf.mxu0
  %3360 = vmatprep.mubr.f32.mxu0 0.0
  %3361 = vmatmul.mubr.f32.gmra.mxu0 %v3092
  %v3362 = vpop.f32.mrf.mxu0
  %v3363 = vadd.f32 0.0, %v3362
  %v3364 = vpop.f32.mrf.mxu0
  %3365 = vmatprep.mubr.f32.mxu0 0.0
  %3366 = vmatmul.mubr.f32.gmra.mxu0 %v3095
  %v3367 = vpop.f32.mrf.mxu0
  %v3368 = vadd.f32 0.0, %v3367
  %v3369 = vpop.f32.mrf.mxu0
  %3370 = vmatprep.mubr.f32.mxu0 0.0
  %3371 = vmatmul.mubr.f32.gmra.mxu0 %v3098
  %v3372 = vpop.f32.mrf.mxu0
  %v3373 = vadd.f32 0.0, %v3372
  %v3374 = vpop.f32.mrf.mxu0
  %3375 = vmatprep.mubr.f32.mxu0 0.0
  %3376 = vmatmul.mubr.f32.gmra.mxu0 %v3101
  %v3377 = vpop.f32.mrf.mxu0
  %v3378 = vadd.f32 0.0, %v3377
  %v3379 = vpop.f32.mrf.mxu0
  %3380 = vmatprep.mubr.f32.mxu0 0.0
  %3381 = vmatmul.mubr.f32.gmra.mxu0 %v3104
  %v3382 = vpop.f32.mrf.mxu0
  %v3383 = vadd.f32 0.0, %v3382
  %v3384 = vpop.f32.mrf.mxu0
  %3385 = vmatprep.mubr.f32.mxu0 0.0
  %3386 = vmatmul.mubr.f32.gmra.mxu0 %v3107
  %v3387 = vpop.f32.mrf.mxu0
  %v3388 = vadd.f32 0.0, %v3387
  %v3389 = vpop.f32.mrf.mxu0
  %3390 = vmatprep.mubr.f32.mxu0 0.0
  %3391 = vmatmul.mubr.f32.gmra.mxu0 %v3110
  %v3392 = vpop.f32.mrf.mxu0
  %v3393 = vadd.f32 0.0, %v3392
  %v3394 = vpop.f32.mrf.mxu0
  %3395 = vmatprep.mubr.f32.mxu0 0.0
  %3396 = vmatmul.mubr.f32.gmra.mxu0 %v3113
  %v3397 = vpop.f32.mrf.mxu0
  %v3398 = vadd.f32 0.0, %v3397
  %v3399 = vpop.f32.mrf.mxu0
  %3400 = vmatprep.mubr.f32.mxu0 0.0
  %3401 = vmatmul.mubr.f32.gmra.mxu0 %v3116
  %v3402 = vpop.f32.mrf.mxu0
  %v3403 = vadd.f32 0.0, %v3402
  %v3404 = vpop.f32.mrf.mxu0
  %3405 = vmatprep.mubr.f32.mxu0 0.0
  %3406 = vmatmul.mubr.f32.gmra.mxu0 %v3119
  %v3407 = vpop.f32.mrf.mxu0
  %v3408 = vadd.f32 0.0, %v3407
  %v3409 = vpop.f32.mrf.mxu0
  %3410 = vmatprep.mubr.f32.mxu0 0.0
  %3411 = vmatmul.mubr.f32.gmra.mxu0 %v3122
  %v3412 = vpop.f32.mrf.mxu0
  %v3413 = vadd.f32 0.0, %v3412
  %v3414 = vpop.f32.mrf.mxu0
  %3415 = vmatprep.mubr.f32.mxu0 0.0
  %3416 = vmatmul.mubr.f32.gmra.mxu0 %v3125
  %v3417 = vpop.f32.mrf.mxu0
  %v3418 = vadd.f32 0.0, %v3417
  %v3419 = vpop.f32.mrf.mxu0
  %3420 = vmatprep.mubr.f32.mxu0 0.0
  %3421 = vmatmul.mubr.f32.gmra.mxu0 %v3128
  %v3422 = vpop.f32.mrf.mxu0
  %v3423 = vadd.f32 0.0, %v3422
  %v3424 = vpop.f32.mrf.mxu0
  %3425 = vmatprep.mubr.f32.mxu0 0.0
  %3426 = vmatmul.mubr.f32.gmra.mxu0 %v3131
  %v3427 = vpop.f32.mrf.mxu0
  %v3428 = vadd.f32 0.0, %v3427
  %v3429 = vpop.f32.mrf.mxu0
  %3430 = vmatprep.mubr.f32.mxu0 0.0
  %3431 = vmatmul.mubr.f32.gmra.mxu0 %v3134
  %v3432 = vpop.f32.mrf.mxu0
  %v3433 = vadd.f32 0.0, %v3432
  %v3434 = vpop.f32.mrf.mxu0
  %3435 = vmatprep.mubr.f32.mxu0 0.0
  %3436 = vmatmul.mubr.f32.gmra.mxu0 %v3137
  %v3437 = vpop.f32.mrf.mxu0
  %v3438 = vadd.f32 0.0, %v3437
  %v3439 = vpop.f32.mrf.mxu0
  %3440 = vmatprep.mubr.f32.mxu0 0.0
  %3441 = vmatmul.mubr.f32.gmra.mxu0 %v3140
  %v3442 = vpop.f32.mrf.mxu0
  %v3443 = vadd.f32 0.0, %v3442
  %v3444 = vpop.f32.mrf.mxu0
  %3445 = vmatprep.mubr.f32.mxu0 0.0
  %3446 = vmatmul.mubr.f32.gmra.mxu0 %v3143
  %v3447 = vpop.f32.mrf.mxu0
  %v3448 = vadd.f32 0.0, %v3447
  %v3449 = vpop.f32.mrf.mxu0
  %3450 = vmatprep.mubr.f32.mxu0 0.0
  %3451 = vmatmul.mubr.f32.gmra.mxu0 %v3146
  %v3452 = vpop.f32.mrf.mxu0
  %v3453 = vadd.f32 0.0, %v3452
  %v3454 = vpop.f32.mrf.mxu0
  %3455 = vmatprep.mubr.f32.mxu0 0.0
  %3456 = vmatmul.mubr.f32.gmra.mxu0 %v3149
  %v3457 = vpop.f32.mrf.mxu0
  %v3458 = vadd.f32 0.0, %v3457
  %v3459 = vpop.f32.mrf.mxu0
  %3460 = vmatprep.mubr.f32.mxu0 0.0
  %3461 = vmatmul.mubr.f32.gmra.mxu0 %v3152
  %v3462 = vpop.f32.mrf.mxu0
  %v3463 = vadd.f32 0.0, %v3462
  %v3464 = vpop.f32.mrf.mxu0
  %3465 = vmatprep.mubr.f32.mxu0 0.0
  %3466 = vmatmul.mubr.f32.gmra.mxu0 %v3155
  %v3467 = vpop.f32.mrf.mxu0
  %v3468 = vadd.f32 0.0, %v3467
  %v3469 = vpop.f32.mrf.mxu0
  %3470 = vmatprep.mubr.f32.mxu0 0.0
  %3471 = vmatmul.mubr.f32.gmra.mxu0 %v3158
  %v3472 = vpop.f32.mrf.mxu0
  %v3473 = vadd.f32 0.0, %v3472
  %v3474 = vpop.f32.mrf.mxu0
  %3475 = vmatprep.mubr.f32.mxu0 0.0
  %3476 = vmatmul.mubr.f32.gmra.mxu0 %v3161
  %v3477 = vpop.f32.mrf.mxu0
  %v3478 = vadd.f32 0.0, %v3477
  %v3479 = vpop.f32.mrf.mxu0
  %3480 = vmatprep.mubr.f32.mxu0 0.0
  %3481 = vmatmul.mubr.f32.gmra.mxu0 %v3164
  %v3482 = vpop.f32.mrf.mxu0
  %v3483 = vadd.f32 0.0, %v3482
  %v3484 = vpop.f32.mrf.mxu0
  %3485 = vmatprep.mubr.f32.mxu0 0.0
  %3486 = vmatmul.mubr.f32.gmra.mxu0 %v3167
  %v3487 = vpop.f32.mrf.mxu0
  %v3488 = vadd.f32 0.0, %v3487
  %v3489 = vpop.f32.mrf.mxu0
  %3490 = vmatprep.mubr.f32.mxu0 0.0
  %3491 = vmatmul.mubr.f32.gmra.mxu0 %v3170
  %v3492 = vpop.f32.mrf.mxu0
  %v3493 = vadd.f32 0.0, %v3492
  %v3494 = vpop.f32.mrf.mxu0
  %3495 = vmatprep.mubr.f32.mxu0 0.0
  %3496 = vmatmul.mubr.f32.gmra.mxu0 %v3173
  %v3497 = vpop.f32.mrf.mxu0
  %v3498 = vadd.f32 0.0, %v3497
  %v3499 = vpop.f32.mrf.mxu0
  %3500 = vmatprep.mubr.f32.mxu0 0.0
  %3501 = vmatmul.mubr.f32.gmra.mxu0 %v3176
  %v3502 = vpop.f32.mrf.mxu0
  %v3503 = vadd.f32 0.0, %v3502
  %v3504 = vpop.f32.mrf.mxu0
  %3505 = vmatprep.mubr.f32.mxu0 0.0
  %3506 = vmatmul.mubr.f32.gmra.mxu0 %v3179
  %v3507 = vpop.f32.mrf.mxu0
  %v3508 = vadd.f32 0.0, %v3507
  %v3509 = vpop.f32.mrf.mxu0
  %3510 = vmatprep.mubr.f32.mxu0 0.0
  %3511 = vmatmul.mubr.f32.gmra.mxu0 %v3182
  %v3512 = vpop.f32.mrf.mxu0
  %v3513 = vadd.f32 0.0, %v3512
  %v3514 = vpop.f32.mrf.mxu0
  %3515 = vmatprep.mubr.f32.mxu0 0.0
  %3516 = vmatmul.mubr.f32.gmra.mxu0 %v3185
  %v3517 = vpop.f32.mrf.mxu0
  %v3518 = vadd.f32 0.0, %v3517
  %v3519 = vpop.f32.mrf.mxu0
  %3520 = vmatprep.mubr.f32.mxu0 0.0
  %3521 = vmatmul.mubr.f32.gmra.mxu0 %v3188
  %v3522 = vpop.f32.mrf.mxu0
  %v3523 = vadd.f32 0.0, %v3522
  %v3524 = vpop.f32.mrf.mxu0
  %3525 = vmatprep.mubr.f32.mxu0 0.0
  %3526 = vmatmul.mubr.f32.gmra.mxu0 %v3191
  %v3527 = vpop.f32.mrf.mxu0
  %v3528 = vadd.f32 0.0, %v3527
  %v3529 = vpop.f32.mrf.mxu0
  %3530 = vmatprep.mubr.f32.mxu0 0.0
  %3531 = vmatmul.mubr.f32.gmra.mxu0 %v3194
  %v3532 = vpop.f32.mrf.mxu0
  %v3533 = vadd.f32 0.0, %v3532
  %v3534 = vpop.f32.mrf.mxu0
  %3535 = vmatprep.mubr.f32.mxu0 0.0
  %3536 = vmatmul.mubr.f32.gmra.mxu0 %v3197
  %v3537 = vpop.f32.mrf.mxu0
  %v3538 = vadd.f32 0.0, %v3537
  %v3539 = vpop.f32.mrf.mxu0
  %3540 = vmatprep.mubr.f32.mxu0 0.0
  %3541 = vmatmul.mubr.f32.gmra.mxu0 %v3200
  %v3542 = vpop.f32.mrf.mxu0
  %v3543 = vadd.f32 0.0, %v3542
  %v3544 = vpop.f32.mrf.mxu0
  %3545 = vmatprep.mubr.f32.mxu0 0.0
  %3546 = vmatmul.mubr.f32.gmra.mxu0 %v3203
  %v3547 = vpop.f32.mrf.mxu0
  %v3548 = vadd.f32 0.0, %v3547
  %v3549 = vpop.f32.mrf.mxu0
  %3550 = vmatprep.mubr.f32.mxu0 0.0
  %3551 = vmatmul.mubr.f32.gmra.mxu0 %v3206
  %v3552 = vpop.f32.mrf.mxu0
  %v3553 = vadd.f32 0.0, %v3552
  %v3554 = vpop.f32.mrf.mxu0
  %3555 = vmatprep.mubr.f32.mxu0 0.0
  %3556 = vmatmul.mubr.f32.gmra.mxu0 %v3209
  %v3557 = vpop.f32.mrf.mxu0
  %v3558 = vadd.f32 0.0, %v3557
  %v3559 = vpop.f32.mrf.mxu0
  %3560 = vmatprep.mubr.f32.mxu0 0.0
  %3561 = vmatmul.mubr.f32.gmra.mxu0 %v3212
  %v3562 = vpop.f32.mrf.mxu0
  %v3563 = vadd.f32 0.0, %v3562
  %v3564 = vpop.f32.mrf.mxu0
  %3565 = vmatprep.mubr.f32.mxu0 0.0
  %3566 = vmatmul.mubr.f32.gmra.mxu0 %v3215
  %v3567 = vpop.f32.mrf.mxu0
  %v3568 = vadd.f32 0.0, %v3567
  %v3569 = vpop.f32.mrf.mxu0
  %3570 = vmatprep.mubr.f32.mxu0 0.0
  %3571 = vmatmul.mubr.f32.gmra.mxu0 %v3218
  %v3572 = vpop.f32.mrf.mxu0
  %v3573 = vadd.f32 0.0, %v3572
  %v3574 = vpop.f32.mrf.mxu0
  %3575 = vmatprep.mubr.f32.mxu0 0.0
  %3576 = vmatmul.mubr.f32.gmra.mxu0 %v3221
  %v3577 = vpop.f32.mrf.mxu0
  %v3578 = vadd.f32 0.0, %v3577
  %v3579 = vpop.f32.mrf.mxu0
  %3580 = vmatprep.mubr.f32.mxu0 0.0
  %3581 = vmatmul.mubr.f32.gmra.mxu0 %v3224
  %v3582 = vpop.f32.mrf.mxu0
  %v3583 = vadd.f32 0.0, %v3582
  %v3584 = vpop.f32.mrf.mxu0
  %3585 = vmatprep.mubr.f32.mxu0 0.0
  %3586 = vmatmul.mubr.f32.gmra.mxu0 %v3227
  %v3587 = vpop.f32.mrf.mxu0
  %v3588 = vadd.f32 0.0, %v3587
  %v3589 = vpop.f32.mrf.mxu0
  %3590 = vmatprep.mubr.f32.mxu0 0.0
  %3591 = vmatmul.mubr.f32.gmra.mxu0 %v3230
  %v3592 = vpop.f32.mrf.mxu0
  %v3593 = vadd.f32 0.0, %v3592
  %v3594 = vpop.f32.mrf.mxu0
  %3595 = vmatprep.mubr.f32.mxu0 0.0
  %3596 = vmatmul.mubr.f32.gmra.mxu0 %v3233
  %v3597 = vpop.f32.mrf.mxu0
  %v3598 = vadd.f32 0.0, %v3597
  %v3599 = vpop.f32.mrf.mxu0
  %3600 = vmatprep.mubr.f32.mxu0 0.0
  %3601 = vmatmul.mubr.f32.gmra.mxu0 %v3236
  %v3602 = vpop.f32.mrf.mxu0
  %v3603 = vadd.f32 0.0, %v3602
  %v3604 = vpop.f32.mrf.mxu0
  %3605 = vmatprep.mubr.f32.mxu0 0.0
  %3606 = vmatmul.mubr.f32.gmra.mxu0 %v3239
  %v3607 = vpop.f32.mrf.mxu0
  %v3608 = vadd.f32 0.0, %v3607
  %v3609 = vpop.f32.mrf.mxu0
  %3610 = vmatprep.mubr.f32.mxu0 0.0
  %3611 = vmatmul.mubr.f32.gmra.mxu0 %v3242
  %v3612 = vpop.f32.mrf.mxu0
  %v3613 = vadd.f32 0.0, %v3612
  %v3614 = vpop.f32.mrf.mxu0
  %3615 = vmatprep.mubr.f32.mxu0 0.0
  %3616 = vmatmul.mubr.f32.gmra.mxu0 %v3245
  %v3617 = vpop.f32.mrf.mxu0
  %v3618 = vadd.f32 0.0, %v3617
  %v3619 = vpop.f32.mrf.mxu0
  %3620 = vmatprep.mubr.f32.mxu0 0.0
  %3621 = vmatmul.mubr.f32.gmra.mxu0 %v3248
  %v3622 = vpop.f32.mrf.mxu0
  %v3623 = vadd.f32 0.0, %v3622
  %v3624 = vpop.f32.mrf.mxu0
  %3625 = vmatprep.mubr.f32.mxu0 0.0
  %3626 = vmatmul.mubr.f32.gmra.mxu0 %v3251
  %v3627 = vpop.f32.mrf.mxu0
  %v3628 = vadd.f32 0.0, %v3627
  %v3629 = vpop.f32.mrf.mxu0
  %3630 = vmatprep.mubr.f32.mxu0 0.0
  %3631 = vmatmul.mubr.f32.gmra.mxu0 %v3254
  %v3632 = vpop.f32.mrf.mxu0
  %v3633 = vadd.f32 0.0, %v3632
  %v3634 = vpop.f32.mrf.mxu0
  %3635 = vmatprep.mubr.f32.mxu0 0.0
  %3636 = vmatmul.mubr.f32.gmra.mxu0 %v3257
  %v3637 = vpop.f32.mrf.mxu0
  %v3638 = vadd.f32 0.0, %v3637
  %v3639 = vpop.f32.mrf.mxu0
  %3640 = vmatprep.mubr.f32.mxu0 0.0
  %3641 = vmatmul.mubr.f32.gmra.mxu0 %v3260
  %v3642 = vpop.f32.mrf.mxu0
  %v3643 = vadd.f32 0.0, %v3642
  %v3644 = vpop.f32.mrf.mxu0
  %3645 = vmatprep.mubr.f32.mxu0 0.0
  %3646 = vmatmul.mubr.f32.gmra.mxu0 %v3263
  %v3647 = vpop.f32.mrf.mxu0
  %v3648 = vadd.f32 0.0, %v3647
  %v3649 = vpop.f32.mrf.mxu0
  %3650 = vmatprep.mubr.f32.mxu0 0.0
  %3651 = vmatmul.mubr.f32.gmra.mxu0 %v3266
  %v3652 = vpop.f32.mrf.mxu0
  %v3653 = vadd.f32 0.0, %v3652
  %v3654 = vpop.f32.mrf.mxu0
  %3655 = vdwg.mxu0
  %v3656 = vadd.f32 %v2946, %v3338
  %v3657 = vadd.f32 %v2947, %v3343
  %v3658 = vadd.f32 %v2948, %v3348
  %v3659 = vadd.f32 %v2949, %v3353
  %v3660 = vadd.f32 %v2950, %v3358
  %v3661 = vadd.f32 %v2951, %v3363
  %v3662 = vadd.f32 %v2952, %v3368
  %v3663 = vadd.f32 %v2953, %v3373
  %v3664 = vadd.f32 %v2954, %v3378
  %v3665 = vadd.f32 %v2955, %v3383
  %v3666 = vadd.f32 %v2956, %v3388
  %v3667 = vadd.f32 %v2957, %v3393
  %v3668 = vadd.f32 %v2958, %v3398
  %v3669 = vadd.f32 %v2959, %v3403
  %v3670 = vadd.f32 %v2960, %v3408
  %v3671 = vadd.f32 %v2961, %v3413
  %v3672 = vadd.f32 %v2962, %v3418
  %v3673 = vadd.f32 %v2963, %v3423
  %v3674 = vadd.f32 %v2964, %v3428
  %v3675 = vadd.f32 %v2965, %v3433
  %v3676 = vadd.f32 %v2966, %v3438
  %v3677 = vadd.f32 %v2967, %v3443
  %v3678 = vadd.f32 %v2968, %v3448
  %v3679 = vadd.f32 %v2969, %v3453
  %v3680 = vadd.f32 %v2970, %v3458
  %v3681 = vadd.f32 %v2971, %v3463
  %v3682 = vadd.f32 %v2972, %v3468
  %v3683 = vadd.f32 %v2973, %v3473
  %v3684 = vadd.f32 %v2974, %v3478
  %v3685 = vadd.f32 %v2975, %v3483
  %v3686 = vadd.f32 %v2976, %v3488
  %v3687 = vadd.f32 %v2977, %v3493
  %v3688 = vadd.f32 %v2978, %v3498
  %v3689 = vadd.f32 %v2979, %v3503
  %v3690 = vadd.f32 %v2980, %v3508
  %v3691 = vadd.f32 %v2981, %v3513
  %v3692 = vadd.f32 %v2982, %v3518
  %v3693 = vadd.f32 %v2983, %v3523
  %v3694 = vadd.f32 %v2984, %v3528
  %v3695 = vadd.f32 %v2985, %v3533
  %v3696 = vadd.f32 %v2986, %v3538
  %v3697 = vadd.f32 %v2987, %v3543
  %v3698 = vadd.f32 %v2988, %v3548
  %v3699 = vadd.f32 %v2989, %v3553
  %v3700 = vadd.f32 %v2990, %v3558
  %v3701 = vadd.f32 %v2991, %v3563
  %v3702 = vadd.f32 %v2992, %v3568
  %v3703 = vadd.f32 %v2993, %v3573
  %v3704 = vadd.f32 %v2994, %v3578
  %v3705 = vadd.f32 %v2995, %v3583
  %v3706 = vadd.f32 %v2996, %v3588
  %v3707 = vadd.f32 %v2997, %v3593
  %v3708 = vadd.f32 %v2998, %v3598
  %v3709 = vadd.f32 %v2999, %v3603
  %v3710 = vadd.f32 %v3000, %v3608
  %v3711 = vadd.f32 %v3001, %v3613
  %v3712 = vadd.f32 %v3002, %v3618
  %v3713 = vadd.f32 %v3003, %v3623
  %v3714 = vadd.f32 %v3004, %v3628
  %v3715 = vadd.f32 %v3005, %v3633
  %v3716 = vadd.f32 %v3006, %v3638
  %v3717 = vadd.f32 %v3007, %v3643
  %v3718 = vadd.f32 %v3008, %v3648
  %v3719 = vadd.f32 %v3009, %v3653
  %v3720 = vld [vmem:[%s78 + $0x2] sm:$0xff]
  %v3721 = vld [vmem:[%s78 + $0xa] sm:$0xff]
  %v3722 = vld [vmem:[%s78 + $0x1a] sm:$0xff]
  %v3723 = vld [vmem:[%s78 + $0x22] sm:$0xff]
  %v3724 = vld [vmem:[%s78 + $0x32] sm:$0xff]
  %v3725 = vld [vmem:[%s78 + $0x3a] sm:$0xff]
  %v3726 = vld [vmem:[%s78 + $0x4a] sm:$0xff]
  %v3727 = vld [vmem:[%s78 + $0x52] sm:$0xff]
  %v3728 = vld [vmem:[%s78 + $0x62] sm:$0xff]
  %v3729 = vld [vmem:[%s78 + $0x6a] sm:$0xff]
  %v3730 = vld [vmem:[%s78 + $0x7a] sm:$0xff]
  %v3731 = vld [vmem:[%s78 + $0x82] sm:$0xff]
  %v3732 = vld [vmem:[%s78 + $0x92] sm:$0xff]
  %v3733 = vld [vmem:[%s78 + $0x9a] sm:$0xff]
  %v3734 = vld [vmem:[%s78 + $0xaa] sm:$0xff]
  %v3735 = vld [vmem:[%s78 + $0xb2] sm:$0xff]
  %v3736 = vld [vmem:[%s78 + $0xc2] sm:$0xff]
  %v3737 = vld [vmem:[%s78 + $0xca] sm:$0xff]
  %v3738 = vld [vmem:[%s78 + $0xda] sm:$0xff]
  %v3739 = vld [vmem:[%s78 + $0xe2] sm:$0xff]
  %v3740 = vld [vmem:[%s78 + $0xf2] sm:$0xff]
  %v3741 = vld [vmem:[%s78 + $0xfa] sm:$0xff]
  %v3742 = vld [vmem:[%s78 + $0x10a] sm:$0xff]
  %v3743 = vld [vmem:[%s78 + $0x112] sm:$0xff]
  %v3744 = vld [vmem:[%s78 + $0x122] sm:$0xff]
  %v3745 = vld [vmem:[%s78 + $0x12a] sm:$0xff]
  %v3746 = vld [vmem:[%s78 + $0x13a] sm:$0xff]
  %v3747 = vld [vmem:[%s78 + $0x142] sm:$0xff]
  %v3748 = vld [vmem:[%s78 + $0x152] sm:$0xff]
  %v3749 = vld [vmem:[%s78 + $0x15a] sm:$0xff]
  %v3750 = vld [vmem:[%s78 + $0x16a] sm:$0xff]
  %v3751 = vld [vmem:[%s78 + $0x172] sm:$0xff]
  %v3752 = vld [vmem:[%s78 + $0x1b2] sm:$0xff]
  %v3753 = vld [vmem:[%s78 + $0x1ba] sm:$0xff]
  %v3754 = vld [vmem:[%s78 + $0x1ca] sm:$0xff]
  %v3755 = vld [vmem:[%s78 + $0x1d2] sm:$0xff]
  %v3756 = vld [vmem:[%s78 + $0x1e2] sm:$0xff]
  %v3757 = vld [vmem:[%s78 + $0x1ea] sm:$0xff]
  %v3758 = vld [vmem:[%s78 + $0x1fa] sm:$0xff]
  %v3759 = vld [vmem:[%s78 + $0x202] sm:$0xff]
  %v3760 = vld [vmem:[%s78 + $0x212] sm:$0xff]
  %v3761 = vld [vmem:[%s78 + $0x21a] sm:$0xff]
  %v3762 = vld [vmem:[%s78 + $0x22a] sm:$0xff]
  %v3763 = vld [vmem:[%s78 + $0x232] sm:$0xff]
  %v3764 = vld [vmem:[%s78 + $0x242] sm:$0xff]
  %v3765 = vld [vmem:[%s78 + $0x24a] sm:$0xff]
  %v3766 = vld [vmem:[%s78 + $0x25a] sm:$0xff]
  %v3767 = vld [vmem:[%s78 + $0x262] sm:$0xff]
  %v3768 = vld [vmem:[%s78 + $0x272] sm:$0xff]
  %v3769 = vld [vmem:[%s78 + $0x27a] sm:$0xff]
  %v3770 = vld [vmem:[%s78 + $0x28a] sm:$0xff]
  %v3771 = vld [vmem:[%s78 + $0x292] sm:$0xff]
  %v3772 = vld [vmem:[%s78 + $0x2a2] sm:$0xff]
  %v3773 = vld [vmem:[%s78 + $0x2aa] sm:$0xff]
  %v3774 = vld [vmem:[%s78 + $0x2ba] sm:$0xff]
  %v3775 = vld [vmem:[%s78 + $0x2c2] sm:$0xff]
  %v3776 = vld [vmem:[%s78 + $0x2d2] sm:$0xff]
  %v3777 = vld [vmem:[%s78 + $0x2da] sm:$0xff]
  %v3778 = vld [vmem:[%s78 + $0x2ea] sm:$0xff]
  %v3779 = vld [vmem:[%s78 + $0x2f2] sm:$0xff]
  %v3780 = vld [vmem:[%s78 + $0x302] sm:$0xff]
  %v3781 = vld [vmem:[%s78 + $0x30a] sm:$0xff]
  %v3782 = vld [vmem:[%s78 + $0x31a] sm:$0xff]
  %v3783 = vld [vmem:[%s78 + $0x322] sm:$0xff]
  %s3784 = scalar_lea.vmem %s1, 20
  %v3785 = vld [vmem:[%s3784] sm:$0xf]
  %v3787 = vsel %vm79, %v3720, 0
  %v3790 = vsel %vm79, %v3721, 0
  %v3793 = vsel %vm79, %v3722, 0
  %v3796 = vsel %vm79, %v3723, 0
  %v3799 = vsel %vm79, %v3724, 0
  %v3802 = vsel %vm79, %v3725, 0
  %v3805 = vsel %vm79, %v3726, 0
  %v3808 = vsel %vm79, %v3727, 0
  %v3811 = vsel %vm79, %v3728, 0
  %v3814 = vsel %vm79, %v3729, 0
  %v3817 = vsel %vm79, %v3730, 0
  %v3820 = vsel %vm79, %v3731, 0
  %v3823 = vsel %vm79, %v3732, 0
  %v3826 = vsel %vm79, %v3733, 0
  %v3829 = vsel %vm79, %v3734, 0
  %v3832 = vsel %vm79, %v3735, 0
  %v3835 = vsel %vm79, %v3736, 0
  %v3838 = vsel %vm79, %v3737, 0
  %v3841 = vsel %vm79, %v3738, 0
  %v3844 = vsel %vm79, %v3739, 0
  %v3847 = vsel %vm79, %v3740, 0
  %v3850 = vsel %vm79, %v3741, 0
  %v3853 = vsel %vm79, %v3742, 0
  %v3856 = vsel %vm79, %v3743, 0
  %v3859 = vsel %vm79, %v3744, 0
  %v3862 = vsel %vm79, %v3745, 0
  %v3865 = vsel %vm79, %v3746, 0
  %v3868 = vsel %vm79, %v3747, 0
  %v3871 = vsel %vm79, %v3748, 0
  %v3874 = vsel %vm79, %v3749, 0
  %v3877 = vsel %vm79, %v3750, 0
  %v3880 = vsel %vm79, %v3751, 0
  %v3883 = vsel %vm79, %v3752, 0
  %v3886 = vsel %vm79, %v3753, 0
  %v3889 = vsel %vm79, %v3754, 0
  %v3892 = vsel %vm79, %v3755, 0
  %v3895 = vsel %vm79, %v3756, 0
  %v3898 = vsel %vm79, %v3757, 0
  %v3901 = vsel %vm79, %v3758, 0
  %v3904 = vsel %vm79, %v3759, 0
  %v3907 = vsel %vm79, %v3760, 0
  %v3910 = vsel %vm79, %v3761, 0
  %v3913 = vsel %vm79, %v3762, 0
  %v3916 = vsel %vm79, %v3763, 0
  %v3919 = vsel %vm79, %v3764, 0
  %v3922 = vsel %vm79, %v3765, 0
  %v3925 = vsel %vm79, %v3766, 0
  %v3928 = vsel %vm79, %v3767, 0
  %v3931 = vsel %vm79, %v3768, 0
  %v3934 = vsel %vm79, %v3769, 0
  %v3937 = vsel %vm79, %v3770, 0
  %v3940 = vsel %vm79, %v3771, 0
  %v3943 = vsel %vm79, %v3772, 0
  %v3946 = vsel %vm79, %v3773, 0
  %v3949 = vsel %vm79, %v3774, 0
  %v3952 = vsel %vm79, %v3775, 0
  %v3955 = vsel %vm79, %v3776, 0
  %v3958 = vsel %vm79, %v3777, 0
  %v3961 = vsel %vm79, %v3778, 0
  %v3964 = vsel %vm79, %v3779, 0
  %v3967 = vsel %vm79, %v3780, 0
  %v3970 = vsel %vm79, %v3781, 0
  %v3973 = vsel %vm79, %v3782, 0
  %v3976 = vsel %vm79, %v3783, 0
  %v3979 = vsel %vm621, %v3785, 0
  %3981 = vmatprep.subr.mxu0 0.0
  %3982 = vmatpush1.msra.mxu0 0.0
  %3983 = vmatprep.subr.mxu0 0.0
  %3984 = vmatpush1.msra.mxu0 0.0
  %3985 = vmatprep.subr.mxu0 0.0
  %3986 = vmatpush1.msra.mxu0 0.0
  %3987 = vmatprep.subr.mxu0 0.0
  %3988 = vmatpush1.msra.mxu0 0.0
  %3989 = vmatprep.subr.mxu0 0.0
  %3990 = vmatpush1.msra.mxu0 0.0
  %3991 = vmatprep.subr.mxu0 0.0
  %3992 = vmatpush1.msra.mxu0 0.0
  %3993 = vmatprep.subr.mxu0 0.0
  %3994 = vmatpush1.msra.mxu0 0.0
  %3995 = vmatprep.subr.mxu0 0.0
  %3996 = vmatpush1.msra.mxu0 0.0
  %3997 = vmatprep.subr.mxu0 0.0
  %3998 = vmatpush1.msra.mxu0 0.0
  %3999 = vmatprep.subr.mxu0 0.0
  %4000 = vmatpush1.msra.mxu0 0.0
  %4001 = vmatprep.subr.mxu0 0.0
  %4002 = vmatpush1.msra.mxu0 0.0
  %4003 = vmatprep.subr.mxu0 0.0
  %4004 = vmatpush1.msra.mxu0 0.0
  %4005 = vmatprep.subr.mxu0 0.0
  %4006 = vmatpush1.msra.mxu0 0.0
  %4007 = vmatprep.subr.mxu0 0.0
  %4008 = vmatpush1.msra.mxu0 0.0
  %4009 = vmatprep.subr.mxu0 0.0
  %4010 = vmatpush1.msra.mxu0 0.0
  %4011 = vmatprep.subr.mxu0 0.0
  %4012 = vmatpush1.msra.mxu0 %v3979
  %4013 = vmatprep.subr.mxu0 0.0
  %4014 = vmatpush2.msra.mxu0 0.0
  %4015 = vmatprep.subr.mxu0 0.0
  %4016 = vmatpush2.msra.mxu0 0.0
  %4017 = vmatprep.subr.mxu0 0.0
  %4018 = vmatpush2.msra.mxu0 0.0
  %4019 = vmatprep.subr.mxu0 0.0
  %4020 = vmatpush2.msra.mxu0 0.0
  %4021 = vmatprep.subr.mxu0 0.0
  %4022 = vmatpush2.msra.mxu0 0.0
  %4023 = vmatprep.subr.mxu0 0.0
  %4024 = vmatpush2.msra.mxu0 0.0
  %4025 = vmatprep.subr.mxu0 0.0
  %4026 = vmatpush2.msra.mxu0 0.0
  %4027 = vmatprep.subr.mxu0 0.0
  %4028 = vmatpush2.msra.mxu0 0.0
  %4029 = vmatprep.subr.mxu0 0.0
  %4030 = vmatpush2.msra.mxu0 0.0
  %4031 = vmatprep.subr.mxu0 0.0
  %4032 = vmatpush2.msra.mxu0 0.0
  %4033 = vmatprep.subr.mxu0 0.0
  %4034 = vmatpush2.msra.mxu0 0.0
  %4035 = vmatprep.subr.mxu0 0.0
  %4036 = vmatpush2.msra.mxu0 0.0
  %4037 = vmatprep.subr.mxu0 0.0
  %4038 = vmatpush2.msra.mxu0 0.0
  %4039 = vmatprep.subr.mxu0 0.0
  %4040 = vmatpush2.msra.mxu0 0.0
  %4041 = vmatprep.subr.mxu0 0.0
  %4042 = vmatpush2.msra.mxu0 0.0
  %4043 = vmatprep.subr.mxu0 0.0
  %4044 = vmatpush2.msra.mxu0 0.0
  %4045 = vmatprep.mubr.f32.mxu0 0.0
  %4046 = vmatmul.mubr.f32.gmra.mxu0 %v3787
  %v4047 = vpop.f32.mrf.mxu0
  %v4048 = vadd.f32 0.0, %v4047
  %v4049 = vpop.f32.mrf.mxu0
  %4050 = vmatprep.mubr.f32.mxu0 0.0
  %4051 = vmatmul.mubr.f32.gmra.mxu0 %v3790
  %v4052 = vpop.f32.mrf.mxu0
  %v4053 = vadd.f32 0.0, %v4052
  %v4054 = vpop.f32.mrf.mxu0
  %4055 = vmatprep.mubr.f32.mxu0 0.0
  %4056 = vmatmul.mubr.f32.gmra.mxu0 %v3793
  %v4057 = vpop.f32.mrf.mxu0
  %v4058 = vadd.f32 0.0, %v4057
  %v4059 = vpop.f32.mrf.mxu0
  %4060 = vmatprep.mubr.f32.mxu0 0.0
  %4061 = vmatmul.mubr.f32.gmra.mxu0 %v3796
  %v4062 = vpop.f32.mrf.mxu0
  %v4063 = vadd.f32 0.0, %v4062
  %v4064 = vpop.f32.mrf.mxu0
  %4065 = vmatprep.mubr.f32.mxu0 0.0
  %4066 = vmatmul.mubr.f32.gmra.mxu0 %v3799
  %v4067 = vpop.f32.mrf.mxu0
  %v4068 = vadd.f32 0.0, %v4067
  %v4069 = vpop.f32.mrf.mxu0
  %4070 = vmatprep.mubr.f32.mxu0 0.0
  %4071 = vmatmul.mubr.f32.gmra.mxu0 %v3802
  %v4072 = vpop.f32.mrf.mxu0
  %v4073 = vadd.f32 0.0, %v4072
  %v4074 = vpop.f32.mrf.mxu0
  %4075 = vmatprep.mubr.f32.mxu0 0.0
  %4076 = vmatmul.mubr.f32.gmra.mxu0 %v3805
  %v4077 = vpop.f32.mrf.mxu0
  %v4078 = vadd.f32 0.0, %v4077
  %v4079 = vpop.f32.mrf.mxu0
  %4080 = vmatprep.mubr.f32.mxu0 0.0
  %4081 = vmatmul.mubr.f32.gmra.mxu0 %v3808
  %v4082 = vpop.f32.mrf.mxu0
  %v4083 = vadd.f32 0.0, %v4082
  %v4084 = vpop.f32.mrf.mxu0
  %4085 = vmatprep.mubr.f32.mxu0 0.0
  %4086 = vmatmul.mubr.f32.gmra.mxu0 %v3811
  %v4087 = vpop.f32.mrf.mxu0
  %v4088 = vadd.f32 0.0, %v4087
  %v4089 = vpop.f32.mrf.mxu0
  %4090 = vmatprep.mubr.f32.mxu0 0.0
  %4091 = vmatmul.mubr.f32.gmra.mxu0 %v3814
  %v4092 = vpop.f32.mrf.mxu0
  %v4093 = vadd.f32 0.0, %v4092
  %v4094 = vpop.f32.mrf.mxu0
  %4095 = vmatprep.mubr.f32.mxu0 0.0
  %4096 = vmatmul.mubr.f32.gmra.mxu0 %v3817
  %v4097 = vpop.f32.mrf.mxu0
  %v4098 = vadd.f32 0.0, %v4097
  %v4099 = vpop.f32.mrf.mxu0
  %4100 = vmatprep.mubr.f32.mxu0 0.0
  %4101 = vmatmul.mubr.f32.gmra.mxu0 %v3820
  %v4102 = vpop.f32.mrf.mxu0
  %v4103 = vadd.f32 0.0, %v4102
  %v4104 = vpop.f32.mrf.mxu0
  %4105 = vmatprep.mubr.f32.mxu0 0.0
  %4106 = vmatmul.mubr.f32.gmra.mxu0 %v3823
  %v4107 = vpop.f32.mrf.mxu0
  %v4108 = vadd.f32 0.0, %v4107
  %v4109 = vpop.f32.mrf.mxu0
  %4110 = vmatprep.mubr.f32.mxu0 0.0
  %4111 = vmatmul.mubr.f32.gmra.mxu0 %v3826
  %v4112 = vpop.f32.mrf.mxu0
  %v4113 = vadd.f32 0.0, %v4112
  %v4114 = vpop.f32.mrf.mxu0
  %4115 = vmatprep.mubr.f32.mxu0 0.0
  %4116 = vmatmul.mubr.f32.gmra.mxu0 %v3829
  %v4117 = vpop.f32.mrf.mxu0
  %v4118 = vadd.f32 0.0, %v4117
  %v4119 = vpop.f32.mrf.mxu0
  %4120 = vmatprep.mubr.f32.mxu0 0.0
  %4121 = vmatmul.mubr.f32.gmra.mxu0 %v3832
  %v4122 = vpop.f32.mrf.mxu0
  %v4123 = vadd.f32 0.0, %v4122
  %v4124 = vpop.f32.mrf.mxu0
  %4125 = vmatprep.mubr.f32.mxu0 0.0
  %4126 = vmatmul.mubr.f32.gmra.mxu0 %v3835
  %v4127 = vpop.f32.mrf.mxu0
  %v4128 = vadd.f32 0.0, %v4127
  %v4129 = vpop.f32.mrf.mxu0
  %4130 = vmatprep.mubr.f32.mxu0 0.0
  %4131 = vmatmul.mubr.f32.gmra.mxu0 %v3838
  %v4132 = vpop.f32.mrf.mxu0
  %v4133 = vadd.f32 0.0, %v4132
  %v4134 = vpop.f32.mrf.mxu0
  %4135 = vmatprep.mubr.f32.mxu0 0.0
  %4136 = vmatmul.mubr.f32.gmra.mxu0 %v3841
  %v4137 = vpop.f32.mrf.mxu0
  %v4138 = vadd.f32 0.0, %v4137
  %v4139 = vpop.f32.mrf.mxu0
  %4140 = vmatprep.mubr.f32.mxu0 0.0
  %4141 = vmatmul.mubr.f32.gmra.mxu0 %v3844
  %v4142 = vpop.f32.mrf.mxu0
  %v4143 = vadd.f32 0.0, %v4142
  %v4144 = vpop.f32.mrf.mxu0
  %4145 = vmatprep.mubr.f32.mxu0 0.0
  %4146 = vmatmul.mubr.f32.gmra.mxu0 %v3847
  %v4147 = vpop.f32.mrf.mxu0
  %v4148 = vadd.f32 0.0, %v4147
  %v4149 = vpop.f32.mrf.mxu0
  %4150 = vmatprep.mubr.f32.mxu0 0.0
  %4151 = vmatmul.mubr.f32.gmra.mxu0 %v3850
  %v4152 = vpop.f32.mrf.mxu0
  %v4153 = vadd.f32 0.0, %v4152
  %v4154 = vpop.f32.mrf.mxu0
  %4155 = vmatprep.mubr.f32.mxu0 0.0
  %4156 = vmatmul.mubr.f32.gmra.mxu0 %v3853
  %v4157 = vpop.f32.mrf.mxu0
  %v4158 = vadd.f32 0.0, %v4157
  %v4159 = vpop.f32.mrf.mxu0
  %4160 = vmatprep.mubr.f32.mxu0 0.0
  %4161 = vmatmul.mubr.f32.gmra.mxu0 %v3856
  %v4162 = vpop.f32.mrf.mxu0
  %v4163 = vadd.f32 0.0, %v4162
  %v4164 = vpop.f32.mrf.mxu0
  %4165 = vmatprep.mubr.f32.mxu0 0.0
  %4166 = vmatmul.mubr.f32.gmra.mxu0 %v3859
  %v4167 = vpop.f32.mrf.mxu0
  %v4168 = vadd.f32 0.0, %v4167
  %v4169 = vpop.f32.mrf.mxu0
  %4170 = vmatprep.mubr.f32.mxu0 0.0
  %4171 = vmatmul.mubr.f32.gmra.mxu0 %v3862
  %v4172 = vpop.f32.mrf.mxu0
  %v4173 = vadd.f32 0.0, %v4172
  %v4174 = vpop.f32.mrf.mxu0
  %4175 = vmatprep.mubr.f32.mxu0 0.0
  %4176 = vmatmul.mubr.f32.gmra.mxu0 %v3865
  %v4177 = vpop.f32.mrf.mxu0
  %v4178 = vadd.f32 0.0, %v4177
  %v4179 = vpop.f32.mrf.mxu0
  %4180 = vmatprep.mubr.f32.mxu0 0.0
  %4181 = vmatmul.mubr.f32.gmra.mxu0 %v3868
  %v4182 = vpop.f32.mrf.mxu0
  %v4183 = vadd.f32 0.0, %v4182
  %v4184 = vpop.f32.mrf.mxu0
  %4185 = vmatprep.mubr.f32.mxu0 0.0
  %4186 = vmatmul.mubr.f32.gmra.mxu0 %v3871
  %v4187 = vpop.f32.mrf.mxu0
  %v4188 = vadd.f32 0.0, %v4187
  %v4189 = vpop.f32.mrf.mxu0
  %4190 = vmatprep.mubr.f32.mxu0 0.0
  %4191 = vmatmul.mubr.f32.gmra.mxu0 %v3874
  %v4192 = vpop.f32.mrf.mxu0
  %v4193 = vadd.f32 0.0, %v4192
  %v4194 = vpop.f32.mrf.mxu0
  %4195 = vmatprep.mubr.f32.mxu0 0.0
  %4196 = vmatmul.mubr.f32.gmra.mxu0 %v3877
  %v4197 = vpop.f32.mrf.mxu0
  %v4198 = vadd.f32 0.0, %v4197
  %v4199 = vpop.f32.mrf.mxu0
  %4200 = vmatprep.mubr.f32.mxu0 0.0
  %4201 = vmatmul.mubr.f32.gmra.mxu0 %v3880
  %v4202 = vpop.f32.mrf.mxu0
  %v4203 = vadd.f32 0.0, %v4202
  %v4204 = vpop.f32.mrf.mxu0
  %4205 = vmatprep.mubr.f32.mxu0 0.0
  %4206 = vmatmul.mubr.f32.gmra.mxu0 %v3883
  %v4207 = vpop.f32.mrf.mxu0
  %v4208 = vadd.f32 0.0, %v4207
  %v4209 = vpop.f32.mrf.mxu0
  %4210 = vmatprep.mubr.f32.mxu0 0.0
  %4211 = vmatmul.mubr.f32.gmra.mxu0 %v3886
  %v4212 = vpop.f32.mrf.mxu0
  %v4213 = vadd.f32 0.0, %v4212
  %v4214 = vpop.f32.mrf.mxu0
  %4215 = vmatprep.mubr.f32.mxu0 0.0
  %4216 = vmatmul.mubr.f32.gmra.mxu0 %v3889
  %v4217 = vpop.f32.mrf.mxu0
  %v4218 = vadd.f32 0.0, %v4217
  %v4219 = vpop.f32.mrf.mxu0
  %4220 = vmatprep.mubr.f32.mxu0 0.0
  %4221 = vmatmul.mubr.f32.gmra.mxu0 %v3892
  %v4222 = vpop.f32.mrf.mxu0
  %v4223 = vadd.f32 0.0, %v4222
  %v4224 = vpop.f32.mrf.mxu0
  %4225 = vmatprep.mubr.f32.mxu0 0.0
  %4226 = vmatmul.mubr.f32.gmra.mxu0 %v3895
  %v4227 = vpop.f32.mrf.mxu0
  %v4228 = vadd.f32 0.0, %v4227
  %v4229 = vpop.f32.mrf.mxu0
  %4230 = vmatprep.mubr.f32.mxu0 0.0
  %4231 = vmatmul.mubr.f32.gmra.mxu0 %v3898
  %v4232 = vpop.f32.mrf.mxu0
  %v4233 = vadd.f32 0.0, %v4232
  %v4234 = vpop.f32.mrf.mxu0
  %4235 = vmatprep.mubr.f32.mxu0 0.0
  %4236 = vmatmul.mubr.f32.gmra.mxu0 %v3901
  %v4237 = vpop.f32.mrf.mxu0
  %v4238 = vadd.f32 0.0, %v4237
  %v4239 = vpop.f32.mrf.mxu0
  %4240 = vmatprep.mubr.f32.mxu0 0.0
  %4241 = vmatmul.mubr.f32.gmra.mxu0 %v3904
  %v4242 = vpop.f32.mrf.mxu0
  %v4243 = vadd.f32 0.0, %v4242
  %v4244 = vpop.f32.mrf.mxu0
  %4245 = vmatprep.mubr.f32.mxu0 0.0
  %4246 = vmatmul.mubr.f32.gmra.mxu0 %v3907
  %v4247 = vpop.f32.mrf.mxu0
  %v4248 = vadd.f32 0.0, %v4247
  %v4249 = vpop.f32.mrf.mxu0
  %4250 = vmatprep.mubr.f32.mxu0 0.0
  %4251 = vmatmul.mubr.f32.gmra.mxu0 %v3910
  %v4252 = vpop.f32.mrf.mxu0
  %v4253 = vadd.f32 0.0, %v4252
  %v4254 = vpop.f32.mrf.mxu0
  %4255 = vmatprep.mubr.f32.mxu0 0.0
  %4256 = vmatmul.mubr.f32.gmra.mxu0 %v3913
  %v4257 = vpop.f32.mrf.mxu0
  %v4258 = vadd.f32 0.0, %v4257
  %v4259 = vpop.f32.mrf.mxu0
  %4260 = vmatprep.mubr.f32.mxu0 0.0
  %4261 = vmatmul.mubr.f32.gmra.mxu0 %v3916
  %v4262 = vpop.f32.mrf.mxu0
  %v4263 = vadd.f32 0.0, %v4262
  %v4264 = vpop.f32.mrf.mxu0
  %4265 = vmatprep.mubr.f32.mxu0 0.0
  %4266 = vmatmul.mubr.f32.gmra.mxu0 %v3919
  %v4267 = vpop.f32.mrf.mxu0
  %v4268 = vadd.f32 0.0, %v4267
  %v4269 = vpop.f32.mrf.mxu0
  %4270 = vmatprep.mubr.f32.mxu0 0.0
  %4271 = vmatmul.mubr.f32.gmra.mxu0 %v3922
  %v4272 = vpop.f32.mrf.mxu0
  %v4273 = vadd.f32 0.0, %v4272
  %v4274 = vpop.f32.mrf.mxu0
  %4275 = vmatprep.mubr.f32.mxu0 0.0
  %4276 = vmatmul.mubr.f32.gmra.mxu0 %v3925
  %v4277 = vpop.f32.mrf.mxu0
  %v4278 = vadd.f32 0.0, %v4277
  %v4279 = vpop.f32.mrf.mxu0
  %4280 = vmatprep.mubr.f32.mxu0 0.0
  %4281 = vmatmul.mubr.f32.gmra.mxu0 %v3928
  %v4282 = vpop.f32.mrf.mxu0
  %v4283 = vadd.f32 0.0, %v4282
  %v4284 = vpop.f32.mrf.mxu0
  %4285 = vmatprep.mubr.f32.mxu0 0.0
  %4286 = vmatmul.mubr.f32.gmra.mxu0 %v3931
  %v4287 = vpop.f32.mrf.mxu0
  %v4288 = vadd.f32 0.0, %v4287
  %v4289 = vpop.f32.mrf.mxu0
  %4290 = vmatprep.mubr.f32.mxu0 0.0
  %4291 = vmatmul.mubr.f32.gmra.mxu0 %v3934
  %v4292 = vpop.f32.mrf.mxu0
  %v4293 = vadd.f32 0.0, %v4292
  %v4294 = vpop.f32.mrf.mxu0
  %4295 = vmatprep.mubr.f32.mxu0 0.0
  %4296 = vmatmul.mubr.f32.gmra.mxu0 %v3937
  %v4297 = vpop.f32.mrf.mxu0
  %v4298 = vadd.f32 0.0, %v4297
  %v4299 = vpop.f32.mrf.mxu0
  %4300 = vmatprep.mubr.f32.mxu0 0.0
  %4301 = vmatmul.mubr.f32.gmra.mxu0 %v3940
  %v4302 = vpop.f32.mrf.mxu0
  %v4303 = vadd.f32 0.0, %v4302
  %v4304 = vpop.f32.mrf.mxu0
  %4305 = vmatprep.mubr.f32.mxu0 0.0
  %4306 = vmatmul.mubr.f32.gmra.mxu0 %v3943
  %v4307 = vpop.f32.mrf.mxu0
  %v4308 = vadd.f32 0.0, %v4307
  %v4309 = vpop.f32.mrf.mxu0
  %4310 = vmatprep.mubr.f32.mxu0 0.0
  %4311 = vmatmul.mubr.f32.gmra.mxu0 %v3946
  %v4312 = vpop.f32.mrf.mxu0
  %v4313 = vadd.f32 0.0, %v4312
  %v4314 = vpop.f32.mrf.mxu0
  %4315 = vmatprep.mubr.f32.mxu0 0.0
  %4316 = vmatmul.mubr.f32.gmra.mxu0 %v3949
  %v4317 = vpop.f32.mrf.mxu0
  %v4318 = vadd.f32 0.0, %v4317
  %v4319 = vpop.f32.mrf.mxu0
  %4320 = vmatprep.mubr.f32.mxu0 0.0
  %4321 = vmatmul.mubr.f32.gmra.mxu0 %v3952
  %v4322 = vpop.f32.mrf.mxu0
  %v4323 = vadd.f32 0.0, %v4322
  %v4324 = vpop.f32.mrf.mxu0
  %4325 = vmatprep.mubr.f32.mxu0 0.0
  %4326 = vmatmul.mubr.f32.gmra.mxu0 %v3955
  %v4327 = vpop.f32.mrf.mxu0
  %v4328 = vadd.f32 0.0, %v4327
  %v4329 = vpop.f32.mrf.mxu0
  %4330 = vmatprep.mubr.f32.mxu0 0.0
  %4331 = vmatmul.mubr.f32.gmra.mxu0 %v3958
  %v4332 = vpop.f32.mrf.mxu0
  %v4333 = vadd.f32 0.0, %v4332
  %v4334 = vpop.f32.mrf.mxu0
  %4335 = vmatprep.mubr.f32.mxu0 0.0
  %4336 = vmatmul.mubr.f32.gmra.mxu0 %v3961
  %v4337 = vpop.f32.mrf.mxu0
  %v4338 = vadd.f32 0.0, %v4337
  %v4339 = vpop.f32.mrf.mxu0
  %4340 = vmatprep.mubr.f32.mxu0 0.0
  %4341 = vmatmul.mubr.f32.gmra.mxu0 %v3964
  %v4342 = vpop.f32.mrf.mxu0
  %v4343 = vadd.f32 0.0, %v4342
  %v4344 = vpop.f32.mrf.mxu0
  %4345 = vmatprep.mubr.f32.mxu0 0.0
  %4346 = vmatmul.mubr.f32.gmra.mxu0 %v3967
  %v4347 = vpop.f32.mrf.mxu0
  %v4348 = vadd.f32 0.0, %v4347
  %v4349 = vpop.f32.mrf.mxu0
  %4350 = vmatprep.mubr.f32.mxu0 0.0
  %4351 = vmatmul.mubr.f32.gmra.mxu0 %v3970
  %v4352 = vpop.f32.mrf.mxu0
  %v4353 = vadd.f32 0.0, %v4352
  %v4354 = vpop.f32.mrf.mxu0
  %4355 = vmatprep.mubr.f32.mxu0 0.0
  %4356 = vmatmul.mubr.f32.gmra.mxu0 %v3973
  %v4357 = vpop.f32.mrf.mxu0
  %v4358 = vadd.f32 0.0, %v4357
  %v4359 = vpop.f32.mrf.mxu0
  %4360 = vmatprep.mubr.f32.mxu0 0.0
  %4361 = vmatmul.mubr.f32.gmra.mxu0 %v3976
  %v4362 = vpop.f32.mrf.mxu0
  %v4363 = vadd.f32 0.0, %v4362
  %v4364 = vpop.f32.mrf.mxu0
  %4365 = vdwg.mxu0
  %v4366 = vadd.f32 %v3656, %v4048
  %v4367 = vadd.f32 %v3657, %v4053
  %v4368 = vadd.f32 %v3658, %v4058
  %v4369 = vadd.f32 %v3659, %v4063
  %v4370 = vadd.f32 %v3660, %v4068
  %v4371 = vadd.f32 %v3661, %v4073
  %v4372 = vadd.f32 %v3662, %v4078
  %v4373 = vadd.f32 %v3663, %v4083
  %v4374 = vadd.f32 %v3664, %v4088
  %v4375 = vadd.f32 %v3665, %v4093
  %v4376 = vadd.f32 %v3666, %v4098
  %v4377 = vadd.f32 %v3667, %v4103
  %v4378 = vadd.f32 %v3668, %v4108
  %v4379 = vadd.f32 %v3669, %v4113
  %v4380 = vadd.f32 %v3670, %v4118
  %v4381 = vadd.f32 %v3671, %v4123
  %v4382 = vadd.f32 %v3672, %v4128
  %v4383 = vadd.f32 %v3673, %v4133
  %v4384 = vadd.f32 %v3674, %v4138
  %v4385 = vadd.f32 %v3675, %v4143
  %v4386 = vadd.f32 %v3676, %v4148
  %v4387 = vadd.f32 %v3677, %v4153
  %v4388 = vadd.f32 %v3678, %v4158
  %v4389 = vadd.f32 %v3679, %v4163
  %v4390 = vadd.f32 %v3680, %v4168
  %v4391 = vadd.f32 %v3681, %v4173
  %v4392 = vadd.f32 %v3682, %v4178
  %v4393 = vadd.f32 %v3683, %v4183
  %v4394 = vadd.f32 %v3684, %v4188
  %v4395 = vadd.f32 %v3685, %v4193
  %v4396 = vadd.f32 %v3686, %v4198
  %v4397 = vadd.f32 %v3687, %v4203
  %v4398 = vadd.f32 %v3688, %v4208
  %v4399 = vadd.f32 %v3689, %v4213
  %v4400 = vadd.f32 %v3690, %v4218
  %v4401 = vadd.f32 %v3691, %v4223
  %v4402 = vadd.f32 %v3692, %v4228
  %v4403 = vadd.f32 %v3693, %v4233
  %v4404 = vadd.f32 %v3694, %v4238
  %v4405 = vadd.f32 %v3695, %v4243
  %v4406 = vadd.f32 %v3696, %v4248
  %v4407 = vadd.f32 %v3697, %v4253
  %v4408 = vadd.f32 %v3698, %v4258
  %v4409 = vadd.f32 %v3699, %v4263
  %v4410 = vadd.f32 %v3700, %v4268
  %v4411 = vadd.f32 %v3701, %v4273
  %v4412 = vadd.f32 %v3702, %v4278
  %v4413 = vadd.f32 %v3703, %v4283
  %v4414 = vadd.f32 %v3704, %v4288
  %v4415 = vadd.f32 %v3705, %v4293
  %v4416 = vadd.f32 %v3706, %v4298
  %v4417 = vadd.f32 %v3707, %v4303
  %v4418 = vadd.f32 %v3708, %v4308
  %v4419 = vadd.f32 %v3709, %v4313
  %v4420 = vadd.f32 %v3710, %v4318
  %v4421 = vadd.f32 %v3711, %v4323
  %v4422 = vadd.f32 %v3712, %v4328
  %v4423 = vadd.f32 %v3713, %v4333
  %v4424 = vadd.f32 %v3714, %v4338
  %v4425 = vadd.f32 %v3715, %v4343
  %v4426 = vadd.f32 %v3716, %v4348
  %v4427 = vadd.f32 %v3717, %v4353
  %v4428 = vadd.f32 %v3718, %v4358
  %v4429 = vadd.f32 %v3719, %v4363
  %s4430 = scalar_lea.vmem [#allocation2], 48
  %v4431 = vld [vmem:[%s4430] sm:$0xff]
  %v4432 = vld [vmem:[%s4430 + $0x8] sm:$0xff]
  %v4433 = vld [vmem:[%s4430 + $0x18] sm:$0xff]
  %v4434 = vld [vmem:[%s4430 + $0x20] sm:$0xff]
  %v4435 = vld [vmem:[%s4430 + $0x30] sm:$0xff]
  %v4436 = vld [vmem:[%s4430 + $0x38] sm:$0xff]
  %v4437 = vld [vmem:[%s4430 + $0x48] sm:$0xff]
  %v4438 = vld [vmem:[%s4430 + $0x50] sm:$0xff]
  %v4439 = vld [vmem:[%s4430 + $0x60] sm:$0xff]
  %v4440 = vld [vmem:[%s4430 + $0x68] sm:$0xff]
  %v4441 = vld [vmem:[%s4430 + $0x78] sm:$0xff]
  %v4442 = vld [vmem:[%s4430 + $0x80] sm:$0xff]
  %v4443 = vld [vmem:[%s4430 + $0x90] sm:$0xff]
  %v4444 = vld [vmem:[%s4430 + $0x98] sm:$0xff]
  %v4445 = vld [vmem:[%s4430 + $0xa8] sm:$0xff]
  %v4446 = vld [vmem:[%s4430 + $0xb0] sm:$0xff]
  %v4447 = vld [vmem:[%s4430 + $0xc0] sm:$0xff]
  %v4448 = vld [vmem:[%s4430 + $0xc8] sm:$0xff]
  %v4449 = vld [vmem:[%s4430 + $0xd8] sm:$0xff]
  %v4450 = vld [vmem:[%s4430 + $0xe0] sm:$0xff]
  %v4451 = vld [vmem:[%s4430 + $0xf0] sm:$0xff]
  %v4452 = vld [vmem:[%s4430 + $0xf8] sm:$0xff]
  %v4453 = vld [vmem:[%s4430 + $0x108] sm:$0xff]
  %v4454 = vld [vmem:[%s4430 + $0x110] sm:$0xff]
  %v4455 = vld [vmem:[%s4430 + $0x120] sm:$0xff]
  %v4456 = vld [vmem:[%s4430 + $0x128] sm:$0xff]
  %v4457 = vld [vmem:[%s4430 + $0x138] sm:$0xff]
  %v4458 = vld [vmem:[%s4430 + $0x140] sm:$0xff]
  %v4459 = vld [vmem:[%s4430 + $0x150] sm:$0xff]
  %v4460 = vld [vmem:[%s4430 + $0x158] sm:$0xff]
  %v4461 = vld [vmem:[%s4430 + $0x168] sm:$0xff]
  %v4462 = vld [vmem:[%s4430 + $0x170] sm:$0xff]
  %v4463 = vld [vmem:[%s4430 + $0x1b0] sm:$0xff]
  %v4464 = vld [vmem:[%s4430 + $0x1b8] sm:$0xff]
  %v4465 = vld [vmem:[%s4430 + $0x1c8] sm:$0xff]
  %v4466 = vld [vmem:[%s4430 + $0x1d0] sm:$0xff]
  %v4467 = vld [vmem:[%s4430 + $0x1e0] sm:$0xff]
  %v4468 = vld [vmem:[%s4430 + $0x1e8] sm:$0xff]
  %v4469 = vld [vmem:[%s4430 + $0x1f8] sm:$0xff]
  %v4470 = vld [vmem:[%s4430 + $0x200] sm:$0xff]
  %v4471 = vld [vmem:[%s4430 + $0x210] sm:$0xff]
  %v4472 = vld [vmem:[%s4430 + $0x218] sm:$0xff]
  %v4473 = vld [vmem:[%s4430 + $0x228] sm:$0xff]
  %v4474 = vld [vmem:[%s4430 + $0x230] sm:$0xff]
  %v4475 = vld [vmem:[%s4430 + $0x240] sm:$0xff]
  %v4476 = vld [vmem:[%s4430 + $0x248] sm:$0xff]
  %v4477 = vld [vmem:[%s4430 + $0x258] sm:$0xff]
  %v4478 = vld [vmem:[%s4430 + $0x260] sm:$0xff]
  %v4479 = vld [vmem:[%s4430 + $0x270] sm:$0xff]
  %v4480 = vld [vmem:[%s4430 + $0x278] sm:$0xff]
  %v4481 = vld [vmem:[%s4430 + $0x288] sm:$0xff]
  %v4482 = vld [vmem:[%s4430 + $0x290] sm:$0xff]
  %v4483 = vld [vmem:[%s4430 + $0x2a0] sm:$0xff]
  %v4484 = vld [vmem:[%s4430 + $0x2a8] sm:$0xff]
  %v4485 = vld [vmem:[%s4430 + $0x2b8] sm:$0xff]
  %v4486 = vld [vmem:[%s4430 + $0x2c0] sm:$0xff]
  %v4487 = vld [vmem:[%s4430 + $0x2d0] sm:$0xff]
  %v4488 = vld [vmem:[%s4430 + $0x2d8] sm:$0xff]
  %v4489 = vld [vmem:[%s4430 + $0x2e8] sm:$0xff]
  %v4490 = vld [vmem:[%s4430 + $0x2f0] sm:$0xff]
  %v4491 = vld [vmem:[%s4430 + $0x300] sm:$0xff]
  %v4492 = vld [vmem:[%s4430 + $0x308] sm:$0xff]
  %v4493 = vld [vmem:[%s4430 + $0x318] sm:$0xff]
  %v4494 = vld [vmem:[%s4430 + $0x320] sm:$0xff]
  %s4495 = scalar_lea.vmem %s1, 24
  %v4496 = vld [vmem:[%s4495] sm:$0xf]
  %v4498 = vsel %vm79, %v4431, 0
  %v4501 = vsel %vm79, %v4432, 0
  %v4504 = vsel %vm79, %v4433, 0
  %v4507 = vsel %vm79, %v4434, 0
  %v4510 = vsel %vm79, %v4435, 0
  %v4513 = vsel %vm79, %v4436, 0
  %v4516 = vsel %vm79, %v4437, 0
  %v4519 = vsel %vm79, %v4438, 0
  %v4522 = vsel %vm79, %v4439, 0
  %v4525 = vsel %vm79, %v4440, 0
  %v4528 = vsel %vm79, %v4441, 0
  %v4531 = vsel %vm79, %v4442, 0
  %v4534 = vsel %vm79, %v4443, 0
  %v4537 = vsel %vm79, %v4444, 0
  %v4540 = vsel %vm79, %v4445, 0
  %v4543 = vsel %vm79, %v4446, 0
  %v4546 = vsel %vm79, %v4447, 0
  %v4549 = vsel %vm79, %v4448, 0
  %v4552 = vsel %vm79, %v4449, 0
  %v4555 = vsel %vm79, %v4450, 0
  %v4558 = vsel %vm79, %v4451, 0
  %v4561 = vsel %vm79, %v4452, 0
  %v4564 = vsel %vm79, %v4453, 0
  %v4567 = vsel %vm79, %v4454, 0
  %v4570 = vsel %vm79, %v4455, 0
  %v4573 = vsel %vm79, %v4456, 0
  %v4576 = vsel %vm79, %v4457, 0
  %v4579 = vsel %vm79, %v4458, 0
  %v4582 = vsel %vm79, %v4459, 0
  %v4585 = vsel %vm79, %v4460, 0
  %v4588 = vsel %vm79, %v4461, 0
  %v4591 = vsel %vm79, %v4462, 0
  %v4594 = vsel %vm79, %v4463, 0
  %v4597 = vsel %vm79, %v4464, 0
  %v4600 = vsel %vm79, %v4465, 0
  %v4603 = vsel %vm79, %v4466, 0
  %v4606 = vsel %vm79, %v4467, 0
  %v4609 = vsel %vm79, %v4468, 0
  %v4612 = vsel %vm79, %v4469, 0
  %v4615 = vsel %vm79, %v4470, 0
  %v4618 = vsel %vm79, %v4471, 0
  %v4621 = vsel %vm79, %v4472, 0
  %v4624 = vsel %vm79, %v4473, 0
  %v4627 = vsel %vm79, %v4474, 0
  %v4630 = vsel %vm79, %v4475, 0
  %v4633 = vsel %vm79, %v4476, 0
  %v4636 = vsel %vm79, %v4477, 0
  %v4639 = vsel %vm79, %v4478, 0
  %v4642 = vsel %vm79, %v4479, 0
  %v4645 = vsel %vm79, %v4480, 0
  %v4648 = vsel %vm79, %v4481, 0
  %v4651 = vsel %vm79, %v4482, 0
  %v4654 = vsel %vm79, %v4483, 0
  %v4657 = vsel %vm79, %v4484, 0
  %v4660 = vsel %vm79, %v4485, 0
  %v4663 = vsel %vm79, %v4486, 0
  %v4666 = vsel %vm79, %v4487, 0
  %v4669 = vsel %vm79, %v4488, 0
  %v4672 = vsel %vm79, %v4489, 0
  %v4675 = vsel %vm79, %v4490, 0
  %v4678 = vsel %vm79, %v4491, 0
  %v4681 = vsel %vm79, %v4492, 0
  %v4684 = vsel %vm79, %v4493, 0
  %v4687 = vsel %vm79, %v4494, 0
  %v4690 = vsel %vm621, %v4496, 0
  %4692 = vmatprep.subr.mxu0 0.0
  %4693 = vmatpush1.msra.mxu0 0.0
  %4694 = vmatprep.subr.mxu0 0.0
  %4695 = vmatpush1.msra.mxu0 0.0
  %4696 = vmatprep.subr.mxu0 0.0
  %4697 = vmatpush1.msra.mxu0 0.0
  %4698 = vmatprep.subr.mxu0 0.0
  %4699 = vmatpush1.msra.mxu0 0.0
  %4700 = vmatprep.subr.mxu0 0.0
  %4701 = vmatpush1.msra.mxu0 0.0
  %4702 = vmatprep.subr.mxu0 0.0
  %4703 = vmatpush1.msra.mxu0 0.0
  %4704 = vmatprep.subr.mxu0 0.0
  %4705 = vmatpush1.msra.mxu0 0.0
  %4706 = vmatprep.subr.mxu0 0.0
  %4707 = vmatpush1.msra.mxu0 0.0
  %4708 = vmatprep.subr.mxu0 0.0
  %4709 = vmatpush1.msra.mxu0 0.0
  %4710 = vmatprep.subr.mxu0 0.0
  %4711 = vmatpush1.msra.mxu0 0.0
  %4712 = vmatprep.subr.mxu0 0.0
  %4713 = vmatpush1.msra.mxu0 0.0
  %4714 = vmatprep.subr.mxu0 0.0
  %4715 = vmatpush1.msra.mxu0 0.0
  %4716 = vmatprep.subr.mxu0 0.0
  %4717 = vmatpush1.msra.mxu0 0.0
  %4718 = vmatprep.subr.mxu0 0.0
  %4719 = vmatpush1.msra.mxu0 0.0
  %4720 = vmatprep.subr.mxu0 0.0
  %4721 = vmatpush1.msra.mxu0 0.0
  %4722 = vmatprep.subr.mxu0 0.0
  %4723 = vmatpush1.msra.mxu0 %v4690
  %4724 = vmatprep.subr.mxu0 0.0
  %4725 = vmatpush2.msra.mxu0 0.0
  %4726 = vmatprep.subr.mxu0 0.0
  %4727 = vmatpush2.msra.mxu0 0.0
  %4728 = vmatprep.subr.mxu0 0.0
  %4729 = vmatpush2.msra.mxu0 0.0
  %4730 = vmatprep.subr.mxu0 0.0
  %4731 = vmatpush2.msra.mxu0 0.0
  %4732 = vmatprep.subr.mxu0 0.0
  %4733 = vmatpush2.msra.mxu0 0.0
  %4734 = vmatprep.subr.mxu0 0.0
  %4735 = vmatpush2.msra.mxu0 0.0
  %4736 = vmatprep.subr.mxu0 0.0
  %4737 = vmatpush2.msra.mxu0 0.0
  %4738 = vmatprep.subr.mxu0 0.0
  %4739 = vmatpush2.msra.mxu0 0.0
  %4740 = vmatprep.subr.mxu0 0.0
  %4741 = vmatpush2.msra.mxu0 0.0
  %4742 = vmatprep.subr.mxu0 0.0
  %4743 = vmatpush2.msra.mxu0 0.0
  %4744 = vmatprep.subr.mxu0 0.0
  %4745 = vmatpush2.msra.mxu0 0.0
  %4746 = vmatprep.subr.mxu0 0.0
  %4747 = vmatpush2.msra.mxu0 0.0
  %4748 = vmatprep.subr.mxu0 0.0
  %4749 = vmatpush2.msra.mxu0 0.0
  %4750 = vmatprep.subr.mxu0 0.0
  %4751 = vmatpush2.msra.mxu0 0.0
  %4752 = vmatprep.subr.mxu0 0.0
  %4753 = vmatpush2.msra.mxu0 0.0
  %4754 = vmatprep.subr.mxu0 0.0
  %4755 = vmatpush2.msra.mxu0 0.0
  %4756 = vmatprep.mubr.f32.mxu0 0.0
  %4757 = vmatmul.mubr.f32.gmra.mxu0 %v4498
  %v4758 = vpop.f32.mrf.mxu0
  %v4759 = vadd.f32 0.0, %v4758
  %v4760 = vpop.f32.mrf.mxu0
  %4761 = vmatprep.mubr.f32.mxu0 0.0
  %4762 = vmatmul.mubr.f32.gmra.mxu0 %v4501
  %v4763 = vpop.f32.mrf.mxu0
  %v4764 = vadd.f32 0.0, %v4763
  %v4765 = vpop.f32.mrf.mxu0
  %4766 = vmatprep.mubr.f32.mxu0 0.0
  %4767 = vmatmul.mubr.f32.gmra.mxu0 %v4504
  %v4768 = vpop.f32.mrf.mxu0
  %v4769 = vadd.f32 0.0, %v4768
  %v4770 = vpop.f32.mrf.mxu0
  %4771 = vmatprep.mubr.f32.mxu0 0.0
  %4772 = vmatmul.mubr.f32.gmra.mxu0 %v4507
  %v4773 = vpop.f32.mrf.mxu0
  %v4774 = vadd.f32 0.0, %v4773
  %v4775 = vpop.f32.mrf.mxu0
  %4776 = vmatprep.mubr.f32.mxu0 0.0
  %4777 = vmatmul.mubr.f32.gmra.mxu0 %v4510
  %v4778 = vpop.f32.mrf.mxu0
  %v4779 = vadd.f32 0.0, %v4778
  %v4780 = vpop.f32.mrf.mxu0
  %4781 = vmatprep.mubr.f32.mxu0 0.0
  %4782 = vmatmul.mubr.f32.gmra.mxu0 %v4513
  %v4783 = vpop.f32.mrf.mxu0
  %v4784 = vadd.f32 0.0, %v4783
  %v4785 = vpop.f32.mrf.mxu0
  %4786 = vmatprep.mubr.f32.mxu0 0.0
  %4787 = vmatmul.mubr.f32.gmra.mxu0 %v4516
  %v4788 = vpop.f32.mrf.mxu0
  %v4789 = vadd.f32 0.0, %v4788
  %v4790 = vpop.f32.mrf.mxu0
  %4791 = vmatprep.mubr.f32.mxu0 0.0
  %4792 = vmatmul.mubr.f32.gmra.mxu0 %v4519
  %v4793 = vpop.f32.mrf.mxu0
  %v4794 = vadd.f32 0.0, %v4793
  %v4795 = vpop.f32.mrf.mxu0
  %4796 = vmatprep.mubr.f32.mxu0 0.0
  %4797 = vmatmul.mubr.f32.gmra.mxu0 %v4522
  %v4798 = vpop.f32.mrf.mxu0
  %v4799 = vadd.f32 0.0, %v4798
  %v4800 = vpop.f32.mrf.mxu0
  %4801 = vmatprep.mubr.f32.mxu0 0.0
  %4802 = vmatmul.mubr.f32.gmra.mxu0 %v4525
  %v4803 = vpop.f32.mrf.mxu0
  %v4804 = vadd.f32 0.0, %v4803
  %v4805 = vpop.f32.mrf.mxu0
  %4806 = vmatprep.mubr.f32.mxu0 0.0
  %4807 = vmatmul.mubr.f32.gmra.mxu0 %v4528
  %v4808 = vpop.f32.mrf.mxu0
  %v4809 = vadd.f32 0.0, %v4808
  %v4810 = vpop.f32.mrf.mxu0
  %4811 = vmatprep.mubr.f32.mxu0 0.0
  %4812 = vmatmul.mubr.f32.gmra.mxu0 %v4531
  %v4813 = vpop.f32.mrf.mxu0
  %v4814 = vadd.f32 0.0, %v4813
  %v4815 = vpop.f32.mrf.mxu0
  %4816 = vmatprep.mubr.f32.mxu0 0.0
  %4817 = vmatmul.mubr.f32.gmra.mxu0 %v4534
  %v4818 = vpop.f32.mrf.mxu0
  %v4819 = vadd.f32 0.0, %v4818
  %v4820 = vpop.f32.mrf.mxu0
  %4821 = vmatprep.mubr.f32.mxu0 0.0
  %4822 = vmatmul.mubr.f32.gmra.mxu0 %v4537
  %v4823 = vpop.f32.mrf.mxu0
  %v4824 = vadd.f32 0.0, %v4823
  %v4825 = vpop.f32.mrf.mxu0
  %4826 = vmatprep.mubr.f32.mxu0 0.0
  %4827 = vmatmul.mubr.f32.gmra.mxu0 %v4540
  %v4828 = vpop.f32.mrf.mxu0
  %v4829 = vadd.f32 0.0, %v4828
  %v4830 = vpop.f32.mrf.mxu0
  %4831 = vmatprep.mubr.f32.mxu0 0.0
  %4832 = vmatmul.mubr.f32.gmra.mxu0 %v4543
  %v4833 = vpop.f32.mrf.mxu0
  %v4834 = vadd.f32 0.0, %v4833
  %v4835 = vpop.f32.mrf.mxu0
  %4836 = vmatprep.mubr.f32.mxu0 0.0
  %4837 = vmatmul.mubr.f32.gmra.mxu0 %v4546
  %v4838 = vpop.f32.mrf.mxu0
  %v4839 = vadd.f32 0.0, %v4838
  %v4840 = vpop.f32.mrf.mxu0
  %4841 = vmatprep.mubr.f32.mxu0 0.0
  %4842 = vmatmul.mubr.f32.gmra.mxu0 %v4549
  %v4843 = vpop.f32.mrf.mxu0
  %v4844 = vadd.f32 0.0, %v4843
  %v4845 = vpop.f32.mrf.mxu0
  %4846 = vmatprep.mubr.f32.mxu0 0.0
  %4847 = vmatmul.mubr.f32.gmra.mxu0 %v4552
  %v4848 = vpop.f32.mrf.mxu0
  %v4849 = vadd.f32 0.0, %v4848
  %v4850 = vpop.f32.mrf.mxu0
  %4851 = vmatprep.mubr.f32.mxu0 0.0
  %4852 = vmatmul.mubr.f32.gmra.mxu0 %v4555
  %v4853 = vpop.f32.mrf.mxu0
  %v4854 = vadd.f32 0.0, %v4853
  %v4855 = vpop.f32.mrf.mxu0
  %4856 = vmatprep.mubr.f32.mxu0 0.0
  %4857 = vmatmul.mubr.f32.gmra.mxu0 %v4558
  %v4858 = vpop.f32.mrf.mxu0
  %v4859 = vadd.f32 0.0, %v4858
  %v4860 = vpop.f32.mrf.mxu0
  %4861 = vmatprep.mubr.f32.mxu0 0.0
  %4862 = vmatmul.mubr.f32.gmra.mxu0 %v4561
  %v4863 = vpop.f32.mrf.mxu0
  %v4864 = vadd.f32 0.0, %v4863
  %v4865 = vpop.f32.mrf.mxu0
  %4866 = vmatprep.mubr.f32.mxu0 0.0
  %4867 = vmatmul.mubr.f32.gmra.mxu0 %v4564
  %v4868 = vpop.f32.mrf.mxu0
  %v4869 = vadd.f32 0.0, %v4868
  %v4870 = vpop.f32.mrf.mxu0
  %4871 = vmatprep.mubr.f32.mxu0 0.0
  %4872 = vmatmul.mubr.f32.gmra.mxu0 %v4567
  %v4873 = vpop.f32.mrf.mxu0
  %v4874 = vadd.f32 0.0, %v4873
  %v4875 = vpop.f32.mrf.mxu0
  %4876 = vmatprep.mubr.f32.mxu0 0.0
  %4877 = vmatmul.mubr.f32.gmra.mxu0 %v4570
  %v4878 = vpop.f32.mrf.mxu0
  %v4879 = vadd.f32 0.0, %v4878
  %v4880 = vpop.f32.mrf.mxu0
  %4881 = vmatprep.mubr.f32.mxu0 0.0
  %4882 = vmatmul.mubr.f32.gmra.mxu0 %v4573
  %v4883 = vpop.f32.mrf.mxu0
  %v4884 = vadd.f32 0.0, %v4883
  %v4885 = vpop.f32.mrf.mxu0
  %4886 = vmatprep.mubr.f32.mxu0 0.0
  %4887 = vmatmul.mubr.f32.gmra.mxu0 %v4576
  %v4888 = vpop.f32.mrf.mxu0
  %v4889 = vadd.f32 0.0, %v4888
  %v4890 = vpop.f32.mrf.mxu0
  %4891 = vmatprep.mubr.f32.mxu0 0.0
  %4892 = vmatmul.mubr.f32.gmra.mxu0 %v4579
  %v4893 = vpop.f32.mrf.mxu0
  %v4894 = vadd.f32 0.0, %v4893
  %v4895 = vpop.f32.mrf.mxu0
  %4896 = vmatprep.mubr.f32.mxu0 0.0
  %4897 = vmatmul.mubr.f32.gmra.mxu0 %v4582
  %v4898 = vpop.f32.mrf.mxu0
  %v4899 = vadd.f32 0.0, %v4898
  %v4900 = vpop.f32.mrf.mxu0
  %4901 = vmatprep.mubr.f32.mxu0 0.0
  %4902 = vmatmul.mubr.f32.gmra.mxu0 %v4585
  %v4903 = vpop.f32.mrf.mxu0
  %v4904 = vadd.f32 0.0, %v4903
  %v4905 = vpop.f32.mrf.mxu0
  %4906 = vmatprep.mubr.f32.mxu0 0.0
  %4907 = vmatmul.mubr.f32.gmra.mxu0 %v4588
  %v4908 = vpop.f32.mrf.mxu0
  %v4909 = vadd.f32 0.0, %v4908
  %v4910 = vpop.f32.mrf.mxu0
  %4911 = vmatprep.mubr.f32.mxu0 0.0
  %4912 = vmatmul.mubr.f32.gmra.mxu0 %v4591
  %v4913 = vpop.f32.mrf.mxu0
  %v4914 = vadd.f32 0.0, %v4913
  %v4915 = vpop.f32.mrf.mxu0
  %4916 = vmatprep.mubr.f32.mxu0 0.0
  %4917 = vmatmul.mubr.f32.gmra.mxu0 %v4594
  %v4918 = vpop.f32.mrf.mxu0
  %v4919 = vadd.f32 0.0, %v4918
  %v4920 = vpop.f32.mrf.mxu0
  %4921 = vmatprep.mubr.f32.mxu0 0.0
  %4922 = vmatmul.mubr.f32.gmra.mxu0 %v4597
  %v4923 = vpop.f32.mrf.mxu0
  %v4924 = vadd.f32 0.0, %v4923
  %v4925 = vpop.f32.mrf.mxu0
  %4926 = vmatprep.mubr.f32.mxu0 0.0
  %4927 = vmatmul.mubr.f32.gmra.mxu0 %v4600
  %v4928 = vpop.f32.mrf.mxu0
  %v4929 = vadd.f32 0.0, %v4928
  %v4930 = vpop.f32.mrf.mxu0
  %4931 = vmatprep.mubr.f32.mxu0 0.0
  %4932 = vmatmul.mubr.f32.gmra.mxu0 %v4603
  %v4933 = vpop.f32.mrf.mxu0
  %v4934 = vadd.f32 0.0, %v4933
  %v4935 = vpop.f32.mrf.mxu0
  %4936 = vmatprep.mubr.f32.mxu0 0.0
  %4937 = vmatmul.mubr.f32.gmra.mxu0 %v4606
  %v4938 = vpop.f32.mrf.mxu0
  %v4939 = vadd.f32 0.0, %v4938
  %v4940 = vpop.f32.mrf.mxu0
  %4941 = vmatprep.mubr.f32.mxu0 0.0
  %4942 = vmatmul.mubr.f32.gmra.mxu0 %v4609
  %v4943 = vpop.f32.mrf.mxu0
  %v4944 = vadd.f32 0.0, %v4943
  %v4945 = vpop.f32.mrf.mxu0
  %4946 = vmatprep.mubr.f32.mxu0 0.0
  %4947 = vmatmul.mubr.f32.gmra.mxu0 %v4612
  %v4948 = vpop.f32.mrf.mxu0
  %v4949 = vadd.f32 0.0, %v4948
  %v4950 = vpop.f32.mrf.mxu0
  %4951 = vmatprep.mubr.f32.mxu0 0.0
  %4952 = vmatmul.mubr.f32.gmra.mxu0 %v4615
  %v4953 = vpop.f32.mrf.mxu0
  %v4954 = vadd.f32 0.0, %v4953
  %v4955 = vpop.f32.mrf.mxu0
  %4956 = vmatprep.mubr.f32.mxu0 0.0
  %4957 = vmatmul.mubr.f32.gmra.mxu0 %v4618
  %v4958 = vpop.f32.mrf.mxu0
  %v4959 = vadd.f32 0.0, %v4958
  %v4960 = vpop.f32.mrf.mxu0
  %4961 = vmatprep.mubr.f32.mxu0 0.0
  %4962 = vmatmul.mubr.f32.gmra.mxu0 %v4621
  %v4963 = vpop.f32.mrf.mxu0
  %v4964 = vadd.f32 0.0, %v4963
  %v4965 = vpop.f32.mrf.mxu0
  %4966 = vmatprep.mubr.f32.mxu0 0.0
  %4967 = vmatmul.mubr.f32.gmra.mxu0 %v4624
  %v4968 = vpop.f32.mrf.mxu0
  %v4969 = vadd.f32 0.0, %v4968
  %v4970 = vpop.f32.mrf.mxu0
  %4971 = vmatprep.mubr.f32.mxu0 0.0
  %4972 = vmatmul.mubr.f32.gmra.mxu0 %v4627
  %v4973 = vpop.f32.mrf.mxu0
  %v4974 = vadd.f32 0.0, %v4973
  %v4975 = vpop.f32.mrf.mxu0
  %4976 = vmatprep.mubr.f32.mxu0 0.0
  %4977 = vmatmul.mubr.f32.gmra.mxu0 %v4630
  %v4978 = vpop.f32.mrf.mxu0
  %v4979 = vadd.f32 0.0, %v4978
  %v4980 = vpop.f32.mrf.mxu0
  %4981 = vmatprep.mubr.f32.mxu0 0.0
  %4982 = vmatmul.mubr.f32.gmra.mxu0 %v4633
  %v4983 = vpop.f32.mrf.mxu0
  %v4984 = vadd.f32 0.0, %v4983
  %v4985 = vpop.f32.mrf.mxu0
  %4986 = vmatprep.mubr.f32.mxu0 0.0
  %4987 = vmatmul.mubr.f32.gmra.mxu0 %v4636
  %v4988 = vpop.f32.mrf.mxu0
  %v4989 = vadd.f32 0.0, %v4988
  %v4990 = vpop.f32.mrf.mxu0
  %4991 = vmatprep.mubr.f32.mxu0 0.0
  %4992 = vmatmul.mubr.f32.gmra.mxu0 %v4639
  %v4993 = vpop.f32.mrf.mxu0
  %v4994 = vadd.f32 0.0, %v4993
  %v4995 = vpop.f32.mrf.mxu0
  %4996 = vmatprep.mubr.f32.mxu0 0.0
  %4997 = vmatmul.mubr.f32.gmra.mxu0 %v4642
  %v4998 = vpop.f32.mrf.mxu0
  %v4999 = vadd.f32 0.0, %v4998
  %v5000 = vpop.f32.mrf.mxu0
  %5001 = vmatprep.mubr.f32.mxu0 0.0
  %5002 = vmatmul.mubr.f32.gmra.mxu0 %v4645
  %v5003 = vpop.f32.mrf.mxu0
  %v5004 = vadd.f32 0.0, %v5003
  %v5005 = vpop.f32.mrf.mxu0
  %5006 = vmatprep.mubr.f32.mxu0 0.0
  %5007 = vmatmul.mubr.f32.gmra.mxu0 %v4648
  %v5008 = vpop.f32.mrf.mxu0
  %v5009 = vadd.f32 0.0, %v5008
  %v5010 = vpop.f32.mrf.mxu0
  %5011 = vmatprep.mubr.f32.mxu0 0.0
  %5012 = vmatmul.mubr.f32.gmra.mxu0 %v4651
  %v5013 = vpop.f32.mrf.mxu0
  %v5014 = vadd.f32 0.0, %v5013
  %v5015 = vpop.f32.mrf.mxu0
  %5016 = vmatprep.mubr.f32.mxu0 0.0
  %5017 = vmatmul.mubr.f32.gmra.mxu0 %v4654
  %v5018 = vpop.f32.mrf.mxu0
  %v5019 = vadd.f32 0.0, %v5018
  %v5020 = vpop.f32.mrf.mxu0
  %5021 = vmatprep.mubr.f32.mxu0 0.0
  %5022 = vmatmul.mubr.f32.gmra.mxu0 %v4657
  %v5023 = vpop.f32.mrf.mxu0
  %v5024 = vadd.f32 0.0, %v5023
  %v5025 = vpop.f32.mrf.mxu0
  %5026 = vmatprep.mubr.f32.mxu0 0.0
  %5027 = vmatmul.mubr.f32.gmra.mxu0 %v4660
  %v5028 = vpop.f32.mrf.mxu0
  %v5029 = vadd.f32 0.0, %v5028
  %v5030 = vpop.f32.mrf.mxu0
  %5031 = vmatprep.mubr.f32.mxu0 0.0
  %5032 = vmatmul.mubr.f32.gmra.mxu0 %v4663
  %v5033 = vpop.f32.mrf.mxu0
  %v5034 = vadd.f32 0.0, %v5033
  %v5035 = vpop.f32.mrf.mxu0
  %5036 = vmatprep.mubr.f32.mxu0 0.0
  %5037 = vmatmul.mubr.f32.gmra.mxu0 %v4666
  %v5038 = vpop.f32.mrf.mxu0
  %v5039 = vadd.f32 0.0, %v5038
  %v5040 = vpop.f32.mrf.mxu0
  %5041 = vmatprep.mubr.f32.mxu0 0.0
  %5042 = vmatmul.mubr.f32.gmra.mxu0 %v4669
  %v5043 = vpop.f32.mrf.mxu0
  %v5044 = vadd.f32 0.0, %v5043
  %v5045 = vpop.f32.mrf.mxu0
  %5046 = vmatprep.mubr.f32.mxu0 0.0
  %5047 = vmatmul.mubr.f32.gmra.mxu0 %v4672
  %v5048 = vpop.f32.mrf.mxu0
  %v5049 = vadd.f32 0.0, %v5048
  %v5050 = vpop.f32.mrf.mxu0
  %5051 = vmatprep.mubr.f32.mxu0 0.0
  %5052 = vmatmul.mubr.f32.gmra.mxu0 %v4675
  %v5053 = vpop.f32.mrf.mxu0
  %v5054 = vadd.f32 0.0, %v5053
  %v5055 = vpop.f32.mrf.mxu0
  %5056 = vmatprep.mubr.f32.mxu0 0.0
  %5057 = vmatmul.mubr.f32.gmra.mxu0 %v4678
  %v5058 = vpop.f32.mrf.mxu0
  %v5059 = vadd.f32 0.0, %v5058
  %v5060 = vpop.f32.mrf.mxu0
  %5061 = vmatprep.mubr.f32.mxu0 0.0
  %5062 = vmatmul.mubr.f32.gmra.mxu0 %v4681
  %v5063 = vpop.f32.mrf.mxu0
  %v5064 = vadd.f32 0.0, %v5063
  %v5065 = vpop.f32.mrf.mxu0
  %5066 = vmatprep.mubr.f32.mxu0 0.0
  %5067 = vmatmul.mubr.f32.gmra.mxu0 %v4684
  %v5068 = vpop.f32.mrf.mxu0
  %v5069 = vadd.f32 0.0, %v5068
  %v5070 = vpop.f32.mrf.mxu0
  %5071 = vmatprep.mubr.f32.mxu0 0.0
  %5072 = vmatmul.mubr.f32.gmra.mxu0 %v4687
  %v5073 = vpop.f32.mrf.mxu0
  %v5074 = vadd.f32 0.0, %v5073
  %v5075 = vpop.f32.mrf.mxu0
  %5076 = vdwg.mxu0
  %v5077 = vadd.f32 %v4366, %v4759
  %v5078 = vadd.f32 %v4367, %v4764
  %v5079 = vadd.f32 %v4368, %v4769
  %v5080 = vadd.f32 %v4369, %v4774
  %v5081 = vadd.f32 %v4370, %v4779
  %v5082 = vadd.f32 %v4371, %v4784
  %v5083 = vadd.f32 %v4372, %v4789
  %v5084 = vadd.f32 %v4373, %v4794
  %v5085 = vadd.f32 %v4374, %v4799
  %v5086 = vadd.f32 %v4375, %v4804
  %v5087 = vadd.f32 %v4376, %v4809
  %v5088 = vadd.f32 %v4377, %v4814
  %v5089 = vadd.f32 %v4378, %v4819
  %v5090 = vadd.f32 %v4379, %v4824
  %v5091 = vadd.f32 %v4380, %v4829
  %v5092 = vadd.f32 %v4381, %v4834
  %v5093 = vadd.f32 %v4382, %v4839
  %v5094 = vadd.f32 %v4383, %v4844
  %v5095 = vadd.f32 %v4384, %v4849
  %v5096 = vadd.f32 %v4385, %v4854
  %v5097 = vadd.f32 %v4386, %v4859
  %v5098 = vadd.f32 %v4387, %v4864
  %v5099 = vadd.f32 %v4388, %v4869
  %v5100 = vadd.f32 %v4389, %v4874
  %v5101 = vadd.f32 %v4390, %v4879
  %v5102 = vadd.f32 %v4391, %v4884
  %v5103 = vadd.f32 %v4392, %v4889
  %v5104 = vadd.f32 %v4393, %v4894
  %v5105 = vadd.f32 %v4394, %v4899
  %v5106 = vadd.f32 %v4395, %v4904
  %v5107 = vadd.f32 %v4396, %v4909
  %v5108 = vadd.f32 %v4397, %v4914
  %v5109 = vadd.f32 %v4398, %v4919
  %v5110 = vadd.f32 %v4399, %v4924
  %v5111 = vadd.f32 %v4400, %v4929
  %v5112 = vadd.f32 %v4401, %v4934
  %v5113 = vadd.f32 %v4402, %v4939
  %v5114 = vadd.f32 %v4403, %v4944
  %v5115 = vadd.f32 %v4404, %v4949
  %v5116 = vadd.f32 %v4405, %v4954
  %v5117 = vadd.f32 %v4406, %v4959
  %v5118 = vadd.f32 %v4407, %v4964
  %v5119 = vadd.f32 %v4408, %v4969
  %v5120 = vadd.f32 %v4409, %v4974
  %v5121 = vadd.f32 %v4410, %v4979
  %v5122 = vadd.f32 %v4411, %v4984
  %v5123 = vadd.f32 %v4412, %v4989
  %v5124 = vadd.f32 %v4413, %v4994
  %v5125 = vadd.f32 %v4414, %v4999
  %v5126 = vadd.f32 %v4415, %v5004
  %v5127 = vadd.f32 %v4416, %v5009
  %v5128 = vadd.f32 %v4417, %v5014
  %v5129 = vadd.f32 %v4418, %v5019
  %v5130 = vadd.f32 %v4419, %v5024
  %v5131 = vadd.f32 %v4420, %v5029
  %v5132 = vadd.f32 %v4421, %v5034
  %v5133 = vadd.f32 %v4422, %v5039
  %v5134 = vadd.f32 %v4423, %v5044
  %v5135 = vadd.f32 %v4424, %v5049
  %v5136 = vadd.f32 %v4425, %v5054
  %v5137 = vadd.f32 %v4426, %v5059
  %v5138 = vadd.f32 %v4427, %v5064
  %v5139 = vadd.f32 %v4428, %v5069
  %v5140 = vadd.f32 %v4429, %v5074
  %v5141 = vld [vmem:[%s4430 + $0x1] sm:$0xff]
  %v5142 = vld [vmem:[%s4430 + $0x9] sm:$0xff]
  %v5143 = vld [vmem:[%s4430 + $0x19] sm:$0xff]
  %v5144 = vld [vmem:[%s4430 + $0x21] sm:$0xff]
  %v5145 = vld [vmem:[%s4430 + $0x31] sm:$0xff]
  %v5146 = vld [vmem:[%s4430 + $0x39] sm:$0xff]
  %v5147 = vld [vmem:[%s4430 + $0x49] sm:$0xff]
  %v5148 = vld [vmem:[%s4430 + $0x51] sm:$0xff]
  %v5149 = vld [vmem:[%s4430 + $0x61] sm:$0xff]
  %v5150 = vld [vmem:[%s4430 + $0x69] sm:$0xff]
  %v5151 = vld [vmem:[%s4430 + $0x79] sm:$0xff]
  %v5152 = vld [vmem:[%s4430 + $0x81] sm:$0xff]
  %v5153 = vld [vmem:[%s4430 + $0x91] sm:$0xff]
  %v5154 = vld [vmem:[%s4430 + $0x99] sm:$0xff]
  %v5155 = vld [vmem:[%s4430 + $0xa9] sm:$0xff]
  %v5156 = vld [vmem:[%s4430 + $0xb1] sm:$0xff]
  %v5157 = vld [vmem:[%s4430 + $0xc1] sm:$0xff]
  %v5158 = vld [vmem:[%s4430 + $0xc9] sm:$0xff]
  %v5159 = vld [vmem:[%s4430 + $0xd9] sm:$0xff]
  %v5160 = vld [vmem:[%s4430 + $0xe1] sm:$0xff]
  %v5161 = vld [vmem:[%s4430 + $0xf1] sm:$0xff]
  %v5162 = vld [vmem:[%s4430 + $0xf9] sm:$0xff]
  %v5163 = vld [vmem:[%s4430 + $0x109] sm:$0xff]
  %v5164 = vld [vmem:[%s4430 + $0x111] sm:$0xff]
  %v5165 = vld [vmem:[%s4430 + $0x121] sm:$0xff]
  %v5166 = vld [vmem:[%s4430 + $0x129] sm:$0xff]
  %v5167 = vld [vmem:[%s4430 + $0x139] sm:$0xff]
  %v5168 = vld [vmem:[%s4430 + $0x141] sm:$0xff]
  %v5169 = vld [vmem:[%s4430 + $0x151] sm:$0xff]
  %v5170 = vld [vmem:[%s4430 + $0x159] sm:$0xff]
  %v5171 = vld [vmem:[%s4430 + $0x169] sm:$0xff]
  %v5172 = vld [vmem:[%s4430 + $0x171] sm:$0xff]
  %v5173 = vld [vmem:[%s4430 + $0x1b1] sm:$0xff]
  %v5174 = vld [vmem:[%s4430 + $0x1b9] sm:$0xff]
  %v5175 = vld [vmem:[%s4430 + $0x1c9] sm:$0xff]
  %v5176 = vld [vmem:[%s4430 + $0x1d1] sm:$0xff]
  %v5177 = vld [vmem:[%s4430 + $0x1e1] sm:$0xff]
  %v5178 = vld [vmem:[%s4430 + $0x1e9] sm:$0xff]
  %v5179 = vld [vmem:[%s4430 + $0x1f9] sm:$0xff]
  %v5180 = vld [vmem:[%s4430 + $0x201] sm:$0xff]
  %v5181 = vld [vmem:[%s4430 + $0x211] sm:$0xff]
  %v5182 = vld [vmem:[%s4430 + $0x219] sm:$0xff]
  %v5183 = vld [vmem:[%s4430 + $0x229] sm:$0xff]
  %v5184 = vld [vmem:[%s4430 + $0x231] sm:$0xff]
  %v5185 = vld [vmem:[%s4430 + $0x241] sm:$0xff]
  %v5186 = vld [vmem:[%s4430 + $0x249] sm:$0xff]
  %v5187 = vld [vmem:[%s4430 + $0x259] sm:$0xff]
  %v5188 = vld [vmem:[%s4430 + $0x261] sm:$0xff]
  %v5189 = vld [vmem:[%s4430 + $0x271] sm:$0xff]
  %v5190 = vld [vmem:[%s4430 + $0x279] sm:$0xff]
  %v5191 = vld [vmem:[%s4430 + $0x289] sm:$0xff]
  %v5192 = vld [vmem:[%s4430 + $0x291] sm:$0xff]
  %v5193 = vld [vmem:[%s4430 + $0x2a1] sm:$0xff]
  %v5194 = vld [vmem:[%s4430 + $0x2a9] sm:$0xff]
  %v5195 = vld [vmem:[%s4430 + $0x2b9] sm:$0xff]
  %v5196 = vld [vmem:[%s4430 + $0x2c1] sm:$0xff]
  %v5197 = vld [vmem:[%s4430 + $0x2d1] sm:$0xff]
  %v5198 = vld [vmem:[%s4430 + $0x2d9] sm:$0xff]
  %v5199 = vld [vmem:[%s4430 + $0x2e9] sm:$0xff]
  %v5200 = vld [vmem:[%s4430 + $0x2f1] sm:$0xff]
  %v5201 = vld [vmem:[%s4430 + $0x301] sm:$0xff]
  %v5202 = vld [vmem:[%s4430 + $0x309] sm:$0xff]
  %v5203 = vld [vmem:[%s4430 + $0x319] sm:$0xff]
  %v5204 = vld [vmem:[%s4430 + $0x321] sm:$0xff]
  %s5205 = scalar_lea.vmem %s1, 28
  %v5206 = vld [vmem:[%s5205] sm:$0xf]
  %v5208 = vsel %vm79, %v5141, 0
  %v5211 = vsel %vm79, %v5142, 0
  %v5214 = vsel %vm79, %v5143, 0
  %v5217 = vsel %vm79, %v5144, 0
  %v5220 = vsel %vm79, %v5145, 0
  %v5223 = vsel %vm79, %v5146, 0
  %v5226 = vsel %vm79, %v5147, 0
  %v5229 = vsel %vm79, %v5148, 0
  %v5232 = vsel %vm79, %v5149, 0
  %v5235 = vsel %vm79, %v5150, 0
  %v5238 = vsel %vm79, %v5151, 0
  %v5241 = vsel %vm79, %v5152, 0
  %v5244 = vsel %vm79, %v5153, 0
  %v5247 = vsel %vm79, %v5154, 0
  %v5250 = vsel %vm79, %v5155, 0
  %v5253 = vsel %vm79, %v5156, 0
  %v5256 = vsel %vm79, %v5157, 0
  %v5259 = vsel %vm79, %v5158, 0
  %v5262 = vsel %vm79, %v5159, 0
  %v5265 = vsel %vm79, %v5160, 0
  %v5268 = vsel %vm79, %v5161, 0
  %v5271 = vsel %vm79, %v5162, 0
  %v5274 = vsel %vm79, %v5163, 0
  %v5277 = vsel %vm79, %v5164, 0
  %v5280 = vsel %vm79, %v5165, 0
  %v5283 = vsel %vm79, %v5166, 0
  %v5286 = vsel %vm79, %v5167, 0
  %v5289 = vsel %vm79, %v5168, 0
  %v5292 = vsel %vm79, %v5169, 0
  %v5295 = vsel %vm79, %v5170, 0
  %v5298 = vsel %vm79, %v5171, 0
  %v5301 = vsel %vm79, %v5172, 0
  %v5304 = vsel %vm79, %v5173, 0
  %v5307 = vsel %vm79, %v5174, 0
  %v5310 = vsel %vm79, %v5175, 0
  %v5313 = vsel %vm79, %v5176, 0
  %v5316 = vsel %vm79, %v5177, 0
  %v5319 = vsel %vm79, %v5178, 0
  %v5322 = vsel %vm79, %v5179, 0
  %v5325 = vsel %vm79, %v5180, 0
  %v5328 = vsel %vm79, %v5181, 0
  %v5331 = vsel %vm79, %v5182, 0
  %v5334 = vsel %vm79, %v5183, 0
  %v5337 = vsel %vm79, %v5184, 0
  %v5340 = vsel %vm79, %v5185, 0
  %v5343 = vsel %vm79, %v5186, 0
  %v5346 = vsel %vm79, %v5187, 0
  %v5349 = vsel %vm79, %v5188, 0
  %v5352 = vsel %vm79, %v5189, 0
  %v5355 = vsel %vm79, %v5190, 0
  %v5358 = vsel %vm79, %v5191, 0
  %v5361 = vsel %vm79, %v5192, 0
  %v5364 = vsel %vm79, %v5193, 0
  %v5367 = vsel %vm79, %v5194, 0
  %v5370 = vsel %vm79, %v5195, 0
  %v5373 = vsel %vm79, %v5196, 0
  %v5376 = vsel %vm79, %v5197, 0
  %v5379 = vsel %vm79, %v5198, 0
  %v5382 = vsel %vm79, %v5199, 0
  %v5385 = vsel %vm79, %v5200, 0
  %v5388 = vsel %vm79, %v5201, 0
  %v5391 = vsel %vm79, %v5202, 0
  %v5394 = vsel %vm79, %v5203, 0
  %v5397 = vsel %vm79, %v5204, 0
  %v5400 = vsel %vm621, %v5206, 0
  %5402 = vmatprep.subr.mxu0 0.0
  %5403 = vmatpush1.msra.mxu0 0.0
  %5404 = vmatprep.subr.mxu0 0.0
  %5405 = vmatpush1.msra.mxu0 0.0
  %5406 = vmatprep.subr.mxu0 0.0
  %5407 = vmatpush1.msra.mxu0 0.0
  %5408 = vmatprep.subr.mxu0 0.0
  %5409 = vmatpush1.msra.mxu0 0.0
  %5410 = vmatprep.subr.mxu0 0.0
  %5411 = vmatpush1.msra.mxu0 0.0
  %5412 = vmatprep.subr.mxu0 0.0
  %5413 = vmatpush1.msra.mxu0 0.0
  %5414 = vmatprep.subr.mxu0 0.0
  %5415 = vmatpush1.msra.mxu0 0.0
  %5416 = vmatprep.subr.mxu0 0.0
  %5417 = vmatpush1.msra.mxu0 0.0
  %5418 = vmatprep.subr.mxu0 0.0
  %5419 = vmatpush1.msra.mxu0 0.0
  %5420 = vmatprep.subr.mxu0 0.0
  %5421 = vmatpush1.msra.mxu0 0.0
  %5422 = vmatprep.subr.mxu0 0.0
  %5423 = vmatpush1.msra.mxu0 0.0
  %5424 = vmatprep.subr.mxu0 0.0
  %5425 = vmatpush1.msra.mxu0 0.0
  %5426 = vmatprep.subr.mxu0 0.0
  %5427 = vmatpush1.msra.mxu0 0.0
  %5428 = vmatprep.subr.mxu0 0.0
  %5429 = vmatpush1.msra.mxu0 0.0
  %5430 = vmatprep.subr.mxu0 0.0
  %5431 = vmatpush1.msra.mxu0 0.0
  %5432 = vmatprep.subr.mxu0 0.0
  %5433 = vmatpush1.msra.mxu0 %v5400
  %5434 = vmatprep.subr.mxu0 0.0
  %5435 = vmatpush2.msra.mxu0 0.0
  %5436 = vmatprep.subr.mxu0 0.0
  %5437 = vmatpush2.msra.mxu0 0.0
  %5438 = vmatprep.subr.mxu0 0.0
  %5439 = vmatpush2.msra.mxu0 0.0
  %5440 = vmatprep.subr.mxu0 0.0
  %5441 = vmatpush2.msra.mxu0 0.0
  %5442 = vmatprep.subr.mxu0 0.0
  %5443 = vmatpush2.msra.mxu0 0.0
  %5444 = vmatprep.subr.mxu0 0.0
  %5445 = vmatpush2.msra.mxu0 0.0
  %5446 = vmatprep.subr.mxu0 0.0
  %5447 = vmatpush2.msra.mxu0 0.0
  %5448 = vmatprep.subr.mxu0 0.0
  %5449 = vmatpush2.msra.mxu0 0.0
  %5450 = vmatprep.subr.mxu0 0.0
  %5451 = vmatpush2.msra.mxu0 0.0
  %5452 = vmatprep.subr.mxu0 0.0
  %5453 = vmatpush2.msra.mxu0 0.0
  %5454 = vmatprep.subr.mxu0 0.0
  %5455 = vmatpush2.msra.mxu0 0.0
  %5456 = vmatprep.subr.mxu0 0.0
  %5457 = vmatpush2.msra.mxu0 0.0
  %5458 = vmatprep.subr.mxu0 0.0
  %5459 = vmatpush2.msra.mxu0 0.0
  %5460 = vmatprep.subr.mxu0 0.0
  %5461 = vmatpush2.msra.mxu0 0.0
  %5462 = vmatprep.subr.mxu0 0.0
  %5463 = vmatpush2.msra.mxu0 0.0
  %5464 = vmatprep.subr.mxu0 0.0
  %5465 = vmatpush2.msra.mxu0 0.0
  %5466 = vmatprep.mubr.f32.mxu0 0.0
  %5467 = vmatmul.mubr.f32.gmra.mxu0 %v5208
  %v5468 = vpop.f32.mrf.mxu0
  %v5469 = vadd.f32 0.0, %v5468
  %v5470 = vpop.f32.mrf.mxu0
  %5471 = vmatprep.mubr.f32.mxu0 0.0
  %5472 = vmatmul.mubr.f32.gmra.mxu0 %v5211
  %v5473 = vpop.f32.mrf.mxu0
  %v5474 = vadd.f32 0.0, %v5473
  %v5475 = vpop.f32.mrf.mxu0
  %5476 = vmatprep.mubr.f32.mxu0 0.0
  %5477 = vmatmul.mubr.f32.gmra.mxu0 %v5214
  %v5478 = vpop.f32.mrf.mxu0
  %v5479 = vadd.f32 0.0, %v5478
  %v5480 = vpop.f32.mrf.mxu0
  %5481 = vmatprep.mubr.f32.mxu0 0.0
  %5482 = vmatmul.mubr.f32.gmra.mxu0 %v5217
  %v5483 = vpop.f32.mrf.mxu0
  %v5484 = vadd.f32 0.0, %v5483
  %v5485 = vpop.f32.mrf.mxu0
  %5486 = vmatprep.mubr.f32.mxu0 0.0
  %5487 = vmatmul.mubr.f32.gmra.mxu0 %v5220
  %v5488 = vpop.f32.mrf.mxu0
  %v5489 = vadd.f32 0.0, %v5488
  %v5490 = vpop.f32.mrf.mxu0
  %5491 = vmatprep.mubr.f32.mxu0 0.0
  %5492 = vmatmul.mubr.f32.gmra.mxu0 %v5223
  %v5493 = vpop.f32.mrf.mxu0
  %v5494 = vadd.f32 0.0, %v5493
  %v5495 = vpop.f32.mrf.mxu0
  %5496 = vmatprep.mubr.f32.mxu0 0.0
  %5497 = vmatmul.mubr.f32.gmra.mxu0 %v5226
  %v5498 = vpop.f32.mrf.mxu0
  %v5499 = vadd.f32 0.0, %v5498
  %v5500 = vpop.f32.mrf.mxu0
  %5501 = vmatprep.mubr.f32.mxu0 0.0
  %5502 = vmatmul.mubr.f32.gmra.mxu0 %v5229
  %v5503 = vpop.f32.mrf.mxu0
  %v5504 = vadd.f32 0.0, %v5503
  %v5505 = vpop.f32.mrf.mxu0
  %5506 = vmatprep.mubr.f32.mxu0 0.0
  %5507 = vmatmul.mubr.f32.gmra.mxu0 %v5232
  %v5508 = vpop.f32.mrf.mxu0
  %v5509 = vadd.f32 0.0, %v5508
  %v5510 = vpop.f32.mrf.mxu0
  %5511 = vmatprep.mubr.f32.mxu0 0.0
  %5512 = vmatmul.mubr.f32.gmra.mxu0 %v5235
  %v5513 = vpop.f32.mrf.mxu0
  %v5514 = vadd.f32 0.0, %v5513
  %v5515 = vpop.f32.mrf.mxu0
  %5516 = vmatprep.mubr.f32.mxu0 0.0
  %5517 = vmatmul.mubr.f32.gmra.mxu0 %v5238
  %v5518 = vpop.f32.mrf.mxu0
  %v5519 = vadd.f32 0.0, %v5518
  %v5520 = vpop.f32.mrf.mxu0
  %5521 = vmatprep.mubr.f32.mxu0 0.0
  %5522 = vmatmul.mubr.f32.gmra.mxu0 %v5241
  %v5523 = vpop.f32.mrf.mxu0
  %v5524 = vadd.f32 0.0, %v5523
  %v5525 = vpop.f32.mrf.mxu0
  %5526 = vmatprep.mubr.f32.mxu0 0.0
  %5527 = vmatmul.mubr.f32.gmra.mxu0 %v5244
  %v5528 = vpop.f32.mrf.mxu0
  %v5529 = vadd.f32 0.0, %v5528
  %v5530 = vpop.f32.mrf.mxu0
  %5531 = vmatprep.mubr.f32.mxu0 0.0
  %5532 = vmatmul.mubr.f32.gmra.mxu0 %v5247
  %v5533 = vpop.f32.mrf.mxu0
  %v5534 = vadd.f32 0.0, %v5533
  %v5535 = vpop.f32.mrf.mxu0
  %5536 = vmatprep.mubr.f32.mxu0 0.0
  %5537 = vmatmul.mubr.f32.gmra.mxu0 %v5250
  %v5538 = vpop.f32.mrf.mxu0
  %v5539 = vadd.f32 0.0, %v5538
  %v5540 = vpop.f32.mrf.mxu0
  %5541 = vmatprep.mubr.f32.mxu0 0.0
  %5542 = vmatmul.mubr.f32.gmra.mxu0 %v5253
  %v5543 = vpop.f32.mrf.mxu0
  %v5544 = vadd.f32 0.0, %v5543
  %v5545 = vpop.f32.mrf.mxu0
  %5546 = vmatprep.mubr.f32.mxu0 0.0
  %5547 = vmatmul.mubr.f32.gmra.mxu0 %v5256
  %v5548 = vpop.f32.mrf.mxu0
  %v5549 = vadd.f32 0.0, %v5548
  %v5550 = vpop.f32.mrf.mxu0
  %5551 = vmatprep.mubr.f32.mxu0 0.0
  %5552 = vmatmul.mubr.f32.gmra.mxu0 %v5259
  %v5553 = vpop.f32.mrf.mxu0
  %v5554 = vadd.f32 0.0, %v5553
  %v5555 = vpop.f32.mrf.mxu0
  %5556 = vmatprep.mubr.f32.mxu0 0.0
  %5557 = vmatmul.mubr.f32.gmra.mxu0 %v5262
  %v5558 = vpop.f32.mrf.mxu0
  %v5559 = vadd.f32 0.0, %v5558
  %v5560 = vpop.f32.mrf.mxu0
  %5561 = vmatprep.mubr.f32.mxu0 0.0
  %5562 = vmatmul.mubr.f32.gmra.mxu0 %v5265
  %v5563 = vpop.f32.mrf.mxu0
  %v5564 = vadd.f32 0.0, %v5563
  %v5565 = vpop.f32.mrf.mxu0
  %5566 = vmatprep.mubr.f32.mxu0 0.0
  %5567 = vmatmul.mubr.f32.gmra.mxu0 %v5268
  %v5568 = vpop.f32.mrf.mxu0
  %v5569 = vadd.f32 0.0, %v5568
  %v5570 = vpop.f32.mrf.mxu0
  %5571 = vmatprep.mubr.f32.mxu0 0.0
  %5572 = vmatmul.mubr.f32.gmra.mxu0 %v5271
  %v5573 = vpop.f32.mrf.mxu0
  %v5574 = vadd.f32 0.0, %v5573
  %v5575 = vpop.f32.mrf.mxu0
  %5576 = vmatprep.mubr.f32.mxu0 0.0
  %5577 = vmatmul.mubr.f32.gmra.mxu0 %v5274
  %v5578 = vpop.f32.mrf.mxu0
  %v5579 = vadd.f32 0.0, %v5578
  %v5580 = vpop.f32.mrf.mxu0
  %5581 = vmatprep.mubr.f32.mxu0 0.0
  %5582 = vmatmul.mubr.f32.gmra.mxu0 %v5277
  %v5583 = vpop.f32.mrf.mxu0
  %v5584 = vadd.f32 0.0, %v5583
  %v5585 = vpop.f32.mrf.mxu0
  %5586 = vmatprep.mubr.f32.mxu0 0.0
  %5587 = vmatmul.mubr.f32.gmra.mxu0 %v5280
  %v5588 = vpop.f32.mrf.mxu0
  %v5589 = vadd.f32 0.0, %v5588
  %v5590 = vpop.f32.mrf.mxu0
  %5591 = vmatprep.mubr.f32.mxu0 0.0
  %5592 = vmatmul.mubr.f32.gmra.mxu0 %v5283
  %v5593 = vpop.f32.mrf.mxu0
  %v5594 = vadd.f32 0.0, %v5593
  %v5595 = vpop.f32.mrf.mxu0
  %5596 = vmatprep.mubr.f32.mxu0 0.0
  %5597 = vmatmul.mubr.f32.gmra.mxu0 %v5286
  %v5598 = vpop.f32.mrf.mxu0
  %v5599 = vadd.f32 0.0, %v5598
  %v5600 = vpop.f32.mrf.mxu0
  %5601 = vmatprep.mubr.f32.mxu0 0.0
  %5602 = vmatmul.mubr.f32.gmra.mxu0 %v5289
  %v5603 = vpop.f32.mrf.mxu0
  %v5604 = vadd.f32 0.0, %v5603
  %v5605 = vpop.f32.mrf.mxu0
  %5606 = vmatprep.mubr.f32.mxu0 0.0
  %5607 = vmatmul.mubr.f32.gmra.mxu0 %v5292
  %v5608 = vpop.f32.mrf.mxu0
  %v5609 = vadd.f32 0.0, %v5608
  %v5610 = vpop.f32.mrf.mxu0
  %5611 = vmatprep.mubr.f32.mxu0 0.0
  %5612 = vmatmul.mubr.f32.gmra.mxu0 %v5295
  %v5613 = vpop.f32.mrf.mxu0
  %v5614 = vadd.f32 0.0, %v5613
  %v5615 = vpop.f32.mrf.mxu0
  %5616 = vmatprep.mubr.f32.mxu0 0.0
  %5617 = vmatmul.mubr.f32.gmra.mxu0 %v5298
  %v5618 = vpop.f32.mrf.mxu0
  %v5619 = vadd.f32 0.0, %v5618
  %v5620 = vpop.f32.mrf.mxu0
  %5621 = vmatprep.mubr.f32.mxu0 0.0
  %5622 = vmatmul.mubr.f32.gmra.mxu0 %v5301
  %v5623 = vpop.f32.mrf.mxu0
  %v5624 = vadd.f32 0.0, %v5623
  %v5625 = vpop.f32.mrf.mxu0
  %5626 = vmatprep.mubr.f32.mxu0 0.0
  %5627 = vmatmul.mubr.f32.gmra.mxu0 %v5304
  %v5628 = vpop.f32.mrf.mxu0
  %v5629 = vadd.f32 0.0, %v5628
  %v5630 = vpop.f32.mrf.mxu0
  %5631 = vmatprep.mubr.f32.mxu0 0.0
  %5632 = vmatmul.mubr.f32.gmra.mxu0 %v5307
  %v5633 = vpop.f32.mrf.mxu0
  %v5634 = vadd.f32 0.0, %v5633
  %v5635 = vpop.f32.mrf.mxu0
  %5636 = vmatprep.mubr.f32.mxu0 0.0
  %5637 = vmatmul.mubr.f32.gmra.mxu0 %v5310
  %v5638 = vpop.f32.mrf.mxu0
  %v5639 = vadd.f32 0.0, %v5638
  %v5640 = vpop.f32.mrf.mxu0
  %5641 = vmatprep.mubr.f32.mxu0 0.0
  %5642 = vmatmul.mubr.f32.gmra.mxu0 %v5313
  %v5643 = vpop.f32.mrf.mxu0
  %v5644 = vadd.f32 0.0, %v5643
  %v5645 = vpop.f32.mrf.mxu0
  %5646 = vmatprep.mubr.f32.mxu0 0.0
  %5647 = vmatmul.mubr.f32.gmra.mxu0 %v5316
  %v5648 = vpop.f32.mrf.mxu0
  %v5649 = vadd.f32 0.0, %v5648
  %v5650 = vpop.f32.mrf.mxu0
  %5651 = vmatprep.mubr.f32.mxu0 0.0
  %5652 = vmatmul.mubr.f32.gmra.mxu0 %v5319
  %v5653 = vpop.f32.mrf.mxu0
  %v5654 = vadd.f32 0.0, %v5653
  %v5655 = vpop.f32.mrf.mxu0
  %5656 = vmatprep.mubr.f32.mxu0 0.0
  %5657 = vmatmul.mubr.f32.gmra.mxu0 %v5322
  %v5658 = vpop.f32.mrf.mxu0
  %v5659 = vadd.f32 0.0, %v5658
  %v5660 = vpop.f32.mrf.mxu0
  %5661 = vmatprep.mubr.f32.mxu0 0.0
  %5662 = vmatmul.mubr.f32.gmra.mxu0 %v5325
  %v5663 = vpop.f32.mrf.mxu0
  %v5664 = vadd.f32 0.0, %v5663
  %v5665 = vpop.f32.mrf.mxu0
  %5666 = vmatprep.mubr.f32.mxu0 0.0
  %5667 = vmatmul.mubr.f32.gmra.mxu0 %v5328
  %v5668 = vpop.f32.mrf.mxu0
  %v5669 = vadd.f32 0.0, %v5668
  %v5670 = vpop.f32.mrf.mxu0
  %5671 = vmatprep.mubr.f32.mxu0 0.0
  %5672 = vmatmul.mubr.f32.gmra.mxu0 %v5331
  %v5673 = vpop.f32.mrf.mxu0
  %v5674 = vadd.f32 0.0, %v5673
  %v5675 = vpop.f32.mrf.mxu0
  %5676 = vmatprep.mubr.f32.mxu0 0.0
  %5677 = vmatmul.mubr.f32.gmra.mxu0 %v5334
  %v5678 = vpop.f32.mrf.mxu0
  %v5679 = vadd.f32 0.0, %v5678
  %v5680 = vpop.f32.mrf.mxu0
  %5681 = vmatprep.mubr.f32.mxu0 0.0
  %5682 = vmatmul.mubr.f32.gmra.mxu0 %v5337
  %v5683 = vpop.f32.mrf.mxu0
  %v5684 = vadd.f32 0.0, %v5683
  %v5685 = vpop.f32.mrf.mxu0
  %5686 = vmatprep.mubr.f32.mxu0 0.0
  %5687 = vmatmul.mubr.f32.gmra.mxu0 %v5340
  %v5688 = vpop.f32.mrf.mxu0
  %v5689 = vadd.f32 0.0, %v5688
  %v5690 = vpop.f32.mrf.mxu0
  %5691 = vmatprep.mubr.f32.mxu0 0.0
  %5692 = vmatmul.mubr.f32.gmra.mxu0 %v5343
  %v5693 = vpop.f32.mrf.mxu0
  %v5694 = vadd.f32 0.0, %v5693
  %v5695 = vpop.f32.mrf.mxu0
  %5696 = vmatprep.mubr.f32.mxu0 0.0
  %5697 = vmatmul.mubr.f32.gmra.mxu0 %v5346
  %v5698 = vpop.f32.mrf.mxu0
  %v5699 = vadd.f32 0.0, %v5698
  %v5700 = vpop.f32.mrf.mxu0
  %5701 = vmatprep.mubr.f32.mxu0 0.0
  %5702 = vmatmul.mubr.f32.gmra.mxu0 %v5349
  %v5703 = vpop.f32.mrf.mxu0
  %v5704 = vadd.f32 0.0, %v5703
  %v5705 = vpop.f32.mrf.mxu0
  %5706 = vmatprep.mubr.f32.mxu0 0.0
  %5707 = vmatmul.mubr.f32.gmra.mxu0 %v5352
  %v5708 = vpop.f32.mrf.mxu0
  %v5709 = vadd.f32 0.0, %v5708
  %v5710 = vpop.f32.mrf.mxu0
  %5711 = vmatprep.mubr.f32.mxu0 0.0
  %5712 = vmatmul.mubr.f32.gmra.mxu0 %v5355
  %v5713 = vpop.f32.mrf.mxu0
  %v5714 = vadd.f32 0.0, %v5713
  %v5715 = vpop.f32.mrf.mxu0
  %5716 = vmatprep.mubr.f32.mxu0 0.0
  %5717 = vmatmul.mubr.f32.gmra.mxu0 %v5358
  %v5718 = vpop.f32.mrf.mxu0
  %v5719 = vadd.f32 0.0, %v5718
  %v5720 = vpop.f32.mrf.mxu0
  %5721 = vmatprep.mubr.f32.mxu0 0.0
  %5722 = vmatmul.mubr.f32.gmra.mxu0 %v5361
  %v5723 = vpop.f32.mrf.mxu0
  %v5724 = vadd.f32 0.0, %v5723
  %v5725 = vpop.f32.mrf.mxu0
  %5726 = vmatprep.mubr.f32.mxu0 0.0
  %5727 = vmatmul.mubr.f32.gmra.mxu0 %v5364
  %v5728 = vpop.f32.mrf.mxu0
  %v5729 = vadd.f32 0.0, %v5728
  %v5730 = vpop.f32.mrf.mxu0
  %5731 = vmatprep.mubr.f32.mxu0 0.0
  %5732 = vmatmul.mubr.f32.gmra.mxu0 %v5367
  %v5733 = vpop.f32.mrf.mxu0
  %v5734 = vadd.f32 0.0, %v5733
  %v5735 = vpop.f32.mrf.mxu0
  %5736 = vmatprep.mubr.f32.mxu0 0.0
  %5737 = vmatmul.mubr.f32.gmra.mxu0 %v5370
  %v5738 = vpop.f32.mrf.mxu0
  %v5739 = vadd.f32 0.0, %v5738
  %v5740 = vpop.f32.mrf.mxu0
  %5741 = vmatprep.mubr.f32.mxu0 0.0
  %5742 = vmatmul.mubr.f32.gmra.mxu0 %v5373
  %v5743 = vpop.f32.mrf.mxu0
  %v5744 = vadd.f32 0.0, %v5743
  %v5745 = vpop.f32.mrf.mxu0
  %5746 = vmatprep.mubr.f32.mxu0 0.0
  %5747 = vmatmul.mubr.f32.gmra.mxu0 %v5376
  %v5748 = vpop.f32.mrf.mxu0
  %v5749 = vadd.f32 0.0, %v5748
  %v5750 = vpop.f32.mrf.mxu0
  %5751 = vmatprep.mubr.f32.mxu0 0.0
  %5752 = vmatmul.mubr.f32.gmra.mxu0 %v5379
  %v5753 = vpop.f32.mrf.mxu0
  %v5754 = vadd.f32 0.0, %v5753
  %v5755 = vpop.f32.mrf.mxu0
  %5756 = vmatprep.mubr.f32.mxu0 0.0
  %5757 = vmatmul.mubr.f32.gmra.mxu0 %v5382
  %v5758 = vpop.f32.mrf.mxu0
  %v5759 = vadd.f32 0.0, %v5758
  %v5760 = vpop.f32.mrf.mxu0
  %5761 = vmatprep.mubr.f32.mxu0 0.0
  %5762 = vmatmul.mubr.f32.gmra.mxu0 %v5385
  %v5763 = vpop.f32.mrf.mxu0
  %v5764 = vadd.f32 0.0, %v5763
  %v5765 = vpop.f32.mrf.mxu0
  %5766 = vmatprep.mubr.f32.mxu0 0.0
  %5767 = vmatmul.mubr.f32.gmra.mxu0 %v5388
  %v5768 = vpop.f32.mrf.mxu0
  %v5769 = vadd.f32 0.0, %v5768
  %v5770 = vpop.f32.mrf.mxu0
  %5771 = vmatprep.mubr.f32.mxu0 0.0
  %5772 = vmatmul.mubr.f32.gmra.mxu0 %v5391
  %v5773 = vpop.f32.mrf.mxu0
  %v5774 = vadd.f32 0.0, %v5773
  %v5775 = vpop.f32.mrf.mxu0
  %5776 = vmatprep.mubr.f32.mxu0 0.0
  %5777 = vmatmul.mubr.f32.gmra.mxu0 %v5394
  %v5778 = vpop.f32.mrf.mxu0
  %v5779 = vadd.f32 0.0, %v5778
  %v5780 = vpop.f32.mrf.mxu0
  %5781 = vmatprep.mubr.f32.mxu0 0.0
  %5782 = vmatmul.mubr.f32.gmra.mxu0 %v5397
  %v5783 = vpop.f32.mrf.mxu0
  %v5784 = vadd.f32 0.0, %v5783
  %v5785 = vpop.f32.mrf.mxu0
  %5786 = vdwg.mxu0
  %v5787 = vadd.f32 %v5077, %v5469
  %v5788 = vadd.f32 %v5078, %v5474
  %v5789 = vadd.f32 %v5079, %v5479
  %v5790 = vadd.f32 %v5080, %v5484
  %v5791 = vadd.f32 %v5081, %v5489
  %v5792 = vadd.f32 %v5082, %v5494
  %v5793 = vadd.f32 %v5083, %v5499
  %v5794 = vadd.f32 %v5084, %v5504
  %v5795 = vadd.f32 %v5085, %v5509
  %v5796 = vadd.f32 %v5086, %v5514
  %v5797 = vadd.f32 %v5087, %v5519
  %v5798 = vadd.f32 %v5088, %v5524
  %v5799 = vadd.f32 %v5089, %v5529
  %v5800 = vadd.f32 %v5090, %v5534
  %v5801 = vadd.f32 %v5091, %v5539
  %v5802 = vadd.f32 %v5092, %v5544
  %v5803 = vadd.f32 %v5093, %v5549
  %v5804 = vadd.f32 %v5094, %v5554
  %v5805 = vadd.f32 %v5095, %v5559
  %v5806 = vadd.f32 %v5096, %v5564
  %v5807 = vadd.f32 %v5097, %v5569
  %v5808 = vadd.f32 %v5098, %v5574
  %v5809 = vadd.f32 %v5099, %v5579
  %v5810 = vadd.f32 %v5100, %v5584
  %v5811 = vadd.f32 %v5101, %v5589
  %v5812 = vadd.f32 %v5102, %v5594
  %v5813 = vadd.f32 %v5103, %v5599
  %v5814 = vadd.f32 %v5104, %v5604
  %v5815 = vadd.f32 %v5105, %v5609
  %v5816 = vadd.f32 %v5106, %v5614
  %v5817 = vadd.f32 %v5107, %v5619
  %v5818 = vadd.f32 %v5108, %v5624
  %v5819 = vadd.f32 %v5109, %v5629
  %v5820 = vadd.f32 %v5110, %v5634
  %v5821 = vadd.f32 %v5111, %v5639
  %v5822 = vadd.f32 %v5112, %v5644
  %v5823 = vadd.f32 %v5113, %v5649
  %v5824 = vadd.f32 %v5114, %v5654
  %v5825 = vadd.f32 %v5115, %v5659
  %v5826 = vadd.f32 %v5116, %v5664
  %v5827 = vadd.f32 %v5117, %v5669
  %v5828 = vadd.f32 %v5118, %v5674
  %v5829 = vadd.f32 %v5119, %v5679
  %v5830 = vadd.f32 %v5120, %v5684
  %v5831 = vadd.f32 %v5121, %v5689
  %v5832 = vadd.f32 %v5122, %v5694
  %v5833 = vadd.f32 %v5123, %v5699
  %v5834 = vadd.f32 %v5124, %v5704
  %v5835 = vadd.f32 %v5125, %v5709
  %v5836 = vadd.f32 %v5126, %v5714
  %v5837 = vadd.f32 %v5127, %v5719
  %v5838 = vadd.f32 %v5128, %v5724
  %v5839 = vadd.f32 %v5129, %v5729
  %v5840 = vadd.f32 %v5130, %v5734
  %v5841 = vadd.f32 %v5131, %v5739
  %v5842 = vadd.f32 %v5132, %v5744
  %v5843 = vadd.f32 %v5133, %v5749
  %v5844 = vadd.f32 %v5134, %v5754
  %v5845 = vadd.f32 %v5135, %v5759
  %v5846 = vadd.f32 %v5136, %v5764
  %v5847 = vadd.f32 %v5137, %v5769
  %v5848 = vadd.f32 %v5138, %v5774
  %v5849 = vadd.f32 %v5139, %v5779
  %v5850 = vadd.f32 %v5140, %v5784
  %v5851 = vld [vmem:[%s4430 + $0x2] sm:$0xff]
  %v5852 = vld [vmem:[%s4430 + $0xa] sm:$0xff]
  %v5853 = vld [vmem:[%s4430 + $0x1a] sm:$0xff]
  %v5854 = vld [vmem:[%s4430 + $0x22] sm:$0xff]
  %v5855 = vld [vmem:[%s4430 + $0x32] sm:$0xff]
  %v5856 = vld [vmem:[%s4430 + $0x3a] sm:$0xff]
  %v5857 = vld [vmem:[%s4430 + $0x4a] sm:$0xff]
  %v5858 = vld [vmem:[%s4430 + $0x52] sm:$0xff]
  %v5859 = vld [vmem:[%s4430 + $0x62] sm:$0xff]
  %v5860 = vld [vmem:[%s4430 + $0x6a] sm:$0xff]
  %v5861 = vld [vmem:[%s4430 + $0x7a] sm:$0xff]
  %v5862 = vld [vmem:[%s4430 + $0x82] sm:$0xff]
  %v5863 = vld [vmem:[%s4430 + $0x92] sm:$0xff]
  %v5864 = vld [vmem:[%s4430 + $0x9a] sm:$0xff]
  %v5865 = vld [vmem:[%s4430 + $0xaa] sm:$0xff]
  %v5866 = vld [vmem:[%s4430 + $0xb2] sm:$0xff]
  %v5867 = vld [vmem:[%s4430 + $0xc2] sm:$0xff]
  %v5868 = vld [vmem:[%s4430 + $0xca] sm:$0xff]
  %v5869 = vld [vmem:[%s4430 + $0xda] sm:$0xff]
  %v5870 = vld [vmem:[%s4430 + $0xe2] sm:$0xff]
  %v5871 = vld [vmem:[%s4430 + $0xf2] sm:$0xff]
  %v5872 = vld [vmem:[%s4430 + $0xfa] sm:$0xff]
  %v5873 = vld [vmem:[%s4430 + $0x10a] sm:$0xff]
  %v5874 = vld [vmem:[%s4430 + $0x112] sm:$0xff]
  %v5875 = vld [vmem:[%s4430 + $0x122] sm:$0xff]
  %v5876 = vld [vmem:[%s4430 + $0x12a] sm:$0xff]
  %v5877 = vld [vmem:[%s4430 + $0x13a] sm:$0xff]
  %v5878 = vld [vmem:[%s4430 + $0x142] sm:$0xff]
  %v5879 = vld [vmem:[%s4430 + $0x152] sm:$0xff]
  %v5880 = vld [vmem:[%s4430 + $0x15a] sm:$0xff]
  %v5881 = vld [vmem:[%s4430 + $0x16a] sm:$0xff]
  %v5882 = vld [vmem:[%s4430 + $0x172] sm:$0xff]
  %v5883 = vld [vmem:[%s4430 + $0x1b2] sm:$0xff]
  %v5884 = vld [vmem:[%s4430 + $0x1ba] sm:$0xff]
  %v5885 = vld [vmem:[%s4430 + $0x1ca] sm:$0xff]
  %v5886 = vld [vmem:[%s4430 + $0x1d2] sm:$0xff]
  %v5887 = vld [vmem:[%s4430 + $0x1e2] sm:$0xff]
  %v5888 = vld [vmem:[%s4430 + $0x1ea] sm:$0xff]
  %v5889 = vld [vmem:[%s4430 + $0x1fa] sm:$0xff]
  %v5890 = vld [vmem:[%s4430 + $0x202] sm:$0xff]
  %v5891 = vld [vmem:[%s4430 + $0x212] sm:$0xff]
  %v5892 = vld [vmem:[%s4430 + $0x21a] sm:$0xff]
  %v5893 = vld [vmem:[%s4430 + $0x22a] sm:$0xff]
  %v5894 = vld [vmem:[%s4430 + $0x232] sm:$0xff]
  %v5895 = vld [vmem:[%s4430 + $0x242] sm:$0xff]
  %v5896 = vld [vmem:[%s4430 + $0x24a] sm:$0xff]
  %v5897 = vld [vmem:[%s4430 + $0x25a] sm:$0xff]
  %v5898 = vld [vmem:[%s4430 + $0x262] sm:$0xff]
  %v5899 = vld [vmem:[%s4430 + $0x272] sm:$0xff]
  %v5900 = vld [vmem:[%s4430 + $0x27a] sm:$0xff]
  %v5901 = vld [vmem:[%s4430 + $0x28a] sm:$0xff]
  %v5902 = vld [vmem:[%s4430 + $0x292] sm:$0xff]
  %v5903 = vld [vmem:[%s4430 + $0x2a2] sm:$0xff]
  %v5904 = vld [vmem:[%s4430 + $0x2aa] sm:$0xff]
  %v5905 = vld [vmem:[%s4430 + $0x2ba] sm:$0xff]
  %v5906 = vld [vmem:[%s4430 + $0x2c2] sm:$0xff]
  %v5907 = vld [vmem:[%s4430 + $0x2d2] sm:$0xff]
  %v5908 = vld [vmem:[%s4430 + $0x2da] sm:$0xff]
  %v5909 = vld [vmem:[%s4430 + $0x2ea] sm:$0xff]
  %v5910 = vld [vmem:[%s4430 + $0x2f2] sm:$0xff]
  %v5911 = vld [vmem:[%s4430 + $0x302] sm:$0xff]
  %v5912 = vld [vmem:[%s4430 + $0x30a] sm:$0xff]
  %v5913 = vld [vmem:[%s4430 + $0x31a] sm:$0xff]
  %v5914 = vld [vmem:[%s4430 + $0x322] sm:$0xff]
  %s5915 = scalar_lea.vmem %s1, 32
  %v5916 = vld [vmem:[%s5915] sm:$0xf]
  %v5918 = vsel %vm79, %v5851, 0
  %v5921 = vsel %vm79, %v5852, 0
  %v5924 = vsel %vm79, %v5853, 0
  %v5927 = vsel %vm79, %v5854, 0
  %v5930 = vsel %vm79, %v5855, 0
  %v5933 = vsel %vm79, %v5856, 0
  %v5936 = vsel %vm79, %v5857, 0
  %v5939 = vsel %vm79, %v5858, 0
  %v5942 = vsel %vm79, %v5859, 0
  %v5945 = vsel %vm79, %v5860, 0
  %v5948 = vsel %vm79, %v5861, 0
  %v5951 = vsel %vm79, %v5862, 0
  %v5954 = vsel %vm79, %v5863, 0
  %v5957 = vsel %vm79, %v5864, 0
  %v5960 = vsel %vm79, %v5865, 0
  %v5963 = vsel %vm79, %v5866, 0
  %v5966 = vsel %vm79, %v5867, 0
  %v5969 = vsel %vm79, %v5868, 0
  %v5972 = vsel %vm79, %v5869, 0
  %v5975 = vsel %vm79, %v5870, 0
  %v5978 = vsel %vm79, %v5871, 0
  %v5981 = vsel %vm79, %v5872, 0
  %v5984 = vsel %vm79, %v5873, 0
  %v5987 = vsel %vm79, %v5874, 0
  %v5990 = vsel %vm79, %v5875, 0
  %v5993 = vsel %vm79, %v5876, 0
  %v5996 = vsel %vm79, %v5877, 0
  %v5999 = vsel %vm79, %v5878, 0
  %v6002 = vsel %vm79, %v5879, 0
  %v6005 = vsel %vm79, %v5880, 0
  %v6008 = vsel %vm79, %v5881, 0
  %v6011 = vsel %vm79, %v5882, 0
  %v6014 = vsel %vm79, %v5883, 0
  %v6017 = vsel %vm79, %v5884, 0
  %v6020 = vsel %vm79, %v5885, 0
  %v6023 = vsel %vm79, %v5886, 0
  %v6026 = vsel %vm79, %v5887, 0
  %v6029 = vsel %vm79, %v5888, 0
  %v6032 = vsel %vm79, %v5889, 0
  %v6035 = vsel %vm79, %v5890, 0
  %v6038 = vsel %vm79, %v5891, 0
  %v6041 = vsel %vm79, %v5892, 0
  %v6044 = vsel %vm79, %v5893, 0
  %v6047 = vsel %vm79, %v5894, 0
  %v6050 = vsel %vm79, %v5895, 0
  %v6053 = vsel %vm79, %v5896, 0
  %v6056 = vsel %vm79, %v5897, 0
  %v6059 = vsel %vm79, %v5898, 0
  %v6062 = vsel %vm79, %v5899, 0
  %v6065 = vsel %vm79, %v5900, 0
  %v6068 = vsel %vm79, %v5901, 0
  %v6071 = vsel %vm79, %v5902, 0
  %v6074 = vsel %vm79, %v5903, 0
  %v6077 = vsel %vm79, %v5904, 0
  %v6080 = vsel %vm79, %v5905, 0
  %v6083 = vsel %vm79, %v5906, 0
  %v6086 = vsel %vm79, %v5907, 0
  %v6089 = vsel %vm79, %v5908, 0
  %v6092 = vsel %vm79, %v5909, 0
  %v6095 = vsel %vm79, %v5910, 0
  %v6098 = vsel %vm79, %v5911, 0
  %v6101 = vsel %vm79, %v5912, 0
  %v6104 = vsel %vm79, %v5913, 0
  %v6107 = vsel %vm79, %v5914, 0
  %v6110 = vsel %vm621, %v5916, 0
  %6112 = vmatprep.subr.mxu0 0.0
  %6113 = vmatpush1.msra.mxu0 0.0
  %6114 = vmatprep.subr.mxu0 0.0
  %6115 = vmatpush1.msra.mxu0 0.0
  %6116 = vmatprep.subr.mxu0 0.0
  %6117 = vmatpush1.msra.mxu0 0.0
  %6118 = vmatprep.subr.mxu0 0.0
  %6119 = vmatpush1.msra.mxu0 0.0
  %6120 = vmatprep.subr.mxu0 0.0
  %6121 = vmatpush1.msra.mxu0 0.0
  %6122 = vmatprep.subr.mxu0 0.0
  %6123 = vmatpush1.msra.mxu0 0.0
  %6124 = vmatprep.subr.mxu0 0.0
  %6125 = vmatpush1.msra.mxu0 0.0
  %6126 = vmatprep.subr.mxu0 0.0
  %6127 = vmatpush1.msra.mxu0 0.0
  %6128 = vmatprep.subr.mxu0 0.0
  %6129 = vmatpush1.msra.mxu0 0.0
  %6130 = vmatprep.subr.mxu0 0.0
  %6131 = vmatpush1.msra.mxu0 0.0
  %6132 = vmatprep.subr.mxu0 0.0
  %6133 = vmatpush1.msra.mxu0 0.0
  %6134 = vmatprep.subr.mxu0 0.0
  %6135 = vmatpush1.msra.mxu0 0.0
  %6136 = vmatprep.subr.mxu0 0.0
  %6137 = vmatpush1.msra.mxu0 0.0
  %6138 = vmatprep.subr.mxu0 0.0
  %6139 = vmatpush1.msra.mxu0 0.0
  %6140 = vmatprep.subr.mxu0 0.0
  %6141 = vmatpush1.msra.mxu0 0.0
  %6142 = vmatprep.subr.mxu0 0.0
  %6143 = vmatpush1.msra.mxu0 %v6110
  %6144 = vmatprep.subr.mxu0 0.0
  %6145 = vmatpush2.msra.mxu0 0.0
  %6146 = vmatprep.subr.mxu0 0.0
  %6147 = vmatpush2.msra.mxu0 0.0
  %6148 = vmatprep.subr.mxu0 0.0
  %6149 = vmatpush2.msra.mxu0 0.0
  %6150 = vmatprep.subr.mxu0 0.0
  %6151 = vmatpush2.msra.mxu0 0.0
  %6152 = vmatprep.subr.mxu0 0.0
  %6153 = vmatpush2.msra.mxu0 0.0
  %6154 = vmatprep.subr.mxu0 0.0
  %6155 = vmatpush2.msra.mxu0 0.0
  %6156 = vmatprep.subr.mxu0 0.0
  %6157 = vmatpush2.msra.mxu0 0.0
  %6158 = vmatprep.subr.mxu0 0.0
  %6159 = vmatpush2.msra.mxu0 0.0
  %6160 = vmatprep.subr.mxu0 0.0
  %6161 = vmatpush2.msra.mxu0 0.0
  %6162 = vmatprep.subr.mxu0 0.0
  %6163 = vmatpush2.msra.mxu0 0.0
  %6164 = vmatprep.subr.mxu0 0.0
  %6165 = vmatpush2.msra.mxu0 0.0
  %6166 = vmatprep.subr.mxu0 0.0
  %6167 = vmatpush2.msra.mxu0 0.0
  %6168 = vmatprep.subr.mxu0 0.0
  %6169 = vmatpush2.msra.mxu0 0.0
  %6170 = vmatprep.subr.mxu0 0.0
  %6171 = vmatpush2.msra.mxu0 0.0
  %6172 = vmatprep.subr.mxu0 0.0
  %6173 = vmatpush2.msra.mxu0 0.0
  %6174 = vmatprep.subr.mxu0 0.0
  %6175 = vmatpush2.msra.mxu0 0.0
  %6176 = vmatprep.mubr.f32.mxu0 0.0
  %6177 = vmatmul.mubr.f32.gmra.mxu0 %v5918
  %v6178 = vpop.f32.mrf.mxu0
  %v6179 = vadd.f32 0.0, %v6178
  %v6180 = vpop.f32.mrf.mxu0
  %6181 = vmatprep.mubr.f32.mxu0 0.0
  %6182 = vmatmul.mubr.f32.gmra.mxu0 %v5921
  %v6183 = vpop.f32.mrf.mxu0
  %v6184 = vadd.f32 0.0, %v6183
  %v6185 = vpop.f32.mrf.mxu0
  %6186 = vmatprep.mubr.f32.mxu0 0.0
  %6187 = vmatmul.mubr.f32.gmra.mxu0 %v5924
  %v6188 = vpop.f32.mrf.mxu0
  %v6189 = vadd.f32 0.0, %v6188
  %v6190 = vpop.f32.mrf.mxu0
  %6191 = vmatprep.mubr.f32.mxu0 0.0
  %6192 = vmatmul.mubr.f32.gmra.mxu0 %v5927
  %v6193 = vpop.f32.mrf.mxu0
  %v6194 = vadd.f32 0.0, %v6193
  %v6195 = vpop.f32.mrf.mxu0
  %6196 = vmatprep.mubr.f32.mxu0 0.0
  %6197 = vmatmul.mubr.f32.gmra.mxu0 %v5930
  %v6198 = vpop.f32.mrf.mxu0
  %v6199 = vadd.f32 0.0, %v6198
  %v6200 = vpop.f32.mrf.mxu0
  %6201 = vmatprep.mubr.f32.mxu0 0.0
  %6202 = vmatmul.mubr.f32.gmra.mxu0 %v5933
  %v6203 = vpop.f32.mrf.mxu0
  %v6204 = vadd.f32 0.0, %v6203
  %v6205 = vpop.f32.mrf.mxu0
  %6206 = vmatprep.mubr.f32.mxu0 0.0
  %6207 = vmatmul.mubr.f32.gmra.mxu0 %v5936
  %v6208 = vpop.f32.mrf.mxu0
  %v6209 = vadd.f32 0.0, %v6208
  %v6210 = vpop.f32.mrf.mxu0
  %6211 = vmatprep.mubr.f32.mxu0 0.0
  %6212 = vmatmul.mubr.f32.gmra.mxu0 %v5939
  %v6213 = vpop.f32.mrf.mxu0
  %v6214 = vadd.f32 0.0, %v6213
  %v6215 = vpop.f32.mrf.mxu0
  %6216 = vmatprep.mubr.f32.mxu0 0.0
  %6217 = vmatmul.mubr.f32.gmra.mxu0 %v5942
  %v6218 = vpop.f32.mrf.mxu0
  %v6219 = vadd.f32 0.0, %v6218
  %v6220 = vpop.f32.mrf.mxu0
  %6221 = vmatprep.mubr.f32.mxu0 0.0
  %6222 = vmatmul.mubr.f32.gmra.mxu0 %v5945
  %v6223 = vpop.f32.mrf.mxu0
  %v6224 = vadd.f32 0.0, %v6223
  %v6225 = vpop.f32.mrf.mxu0
  %6226 = vmatprep.mubr.f32.mxu0 0.0
  %6227 = vmatmul.mubr.f32.gmra.mxu0 %v5948
  %v6228 = vpop.f32.mrf.mxu0
  %v6229 = vadd.f32 0.0, %v6228
  %v6230 = vpop.f32.mrf.mxu0
  %6231 = vmatprep.mubr.f32.mxu0 0.0
  %6232 = vmatmul.mubr.f32.gmra.mxu0 %v5951
  %v6233 = vpop.f32.mrf.mxu0
  %v6234 = vadd.f32 0.0, %v6233
  %v6235 = vpop.f32.mrf.mxu0
  %6236 = vmatprep.mubr.f32.mxu0 0.0
  %6237 = vmatmul.mubr.f32.gmra.mxu0 %v5954
  %v6238 = vpop.f32.mrf.mxu0
  %v6239 = vadd.f32 0.0, %v6238
  %v6240 = vpop.f32.mrf.mxu0
  %6241 = vmatprep.mubr.f32.mxu0 0.0
  %6242 = vmatmul.mubr.f32.gmra.mxu0 %v5957
  %v6243 = vpop.f32.mrf.mxu0
  %v6244 = vadd.f32 0.0, %v6243
  %v6245 = vpop.f32.mrf.mxu0
  %6246 = vmatprep.mubr.f32.mxu0 0.0
  %6247 = vmatmul.mubr.f32.gmra.mxu0 %v5960
  %v6248 = vpop.f32.mrf.mxu0
  %v6249 = vadd.f32 0.0, %v6248
  %v6250 = vpop.f32.mrf.mxu0
  %6251 = vmatprep.mubr.f32.mxu0 0.0
  %6252 = vmatmul.mubr.f32.gmra.mxu0 %v5963
  %v6253 = vpop.f32.mrf.mxu0
  %v6254 = vadd.f32 0.0, %v6253
  %v6255 = vpop.f32.mrf.mxu0
  %6256 = vmatprep.mubr.f32.mxu0 0.0
  %6257 = vmatmul.mubr.f32.gmra.mxu0 %v5966
  %v6258 = vpop.f32.mrf.mxu0
  %v6259 = vadd.f32 0.0, %v6258
  %v6260 = vpop.f32.mrf.mxu0
  %6261 = vmatprep.mubr.f32.mxu0 0.0
  %6262 = vmatmul.mubr.f32.gmra.mxu0 %v5969
  %v6263 = vpop.f32.mrf.mxu0
  %v6264 = vadd.f32 0.0, %v6263
  %v6265 = vpop.f32.mrf.mxu0
  %6266 = vmatprep.mubr.f32.mxu0 0.0
  %6267 = vmatmul.mubr.f32.gmra.mxu0 %v5972
  %v6268 = vpop.f32.mrf.mxu0
  %v6269 = vadd.f32 0.0, %v6268
  %v6270 = vpop.f32.mrf.mxu0
  %6271 = vmatprep.mubr.f32.mxu0 0.0
  %6272 = vmatmul.mubr.f32.gmra.mxu0 %v5975
  %v6273 = vpop.f32.mrf.mxu0
  %v6274 = vadd.f32 0.0, %v6273
  %v6275 = vpop.f32.mrf.mxu0
  %6276 = vmatprep.mubr.f32.mxu0 0.0
  %6277 = vmatmul.mubr.f32.gmra.mxu0 %v5978
  %v6278 = vpop.f32.mrf.mxu0
  %v6279 = vadd.f32 0.0, %v6278
  %v6280 = vpop.f32.mrf.mxu0
  %6281 = vmatprep.mubr.f32.mxu0 0.0
  %6282 = vmatmul.mubr.f32.gmra.mxu0 %v5981
  %v6283 = vpop.f32.mrf.mxu0
  %v6284 = vadd.f32 0.0, %v6283
  %v6285 = vpop.f32.mrf.mxu0
  %6286 = vmatprep.mubr.f32.mxu0 0.0
  %6287 = vmatmul.mubr.f32.gmra.mxu0 %v5984
  %v6288 = vpop.f32.mrf.mxu0
  %v6289 = vadd.f32 0.0, %v6288
  %v6290 = vpop.f32.mrf.mxu0
  %6291 = vmatprep.mubr.f32.mxu0 0.0
  %6292 = vmatmul.mubr.f32.gmra.mxu0 %v5987
  %v6293 = vpop.f32.mrf.mxu0
  %v6294 = vadd.f32 0.0, %v6293
  %v6295 = vpop.f32.mrf.mxu0
  %6296 = vmatprep.mubr.f32.mxu0 0.0
  %6297 = vmatmul.mubr.f32.gmra.mxu0 %v5990
  %v6298 = vpop.f32.mrf.mxu0
  %v6299 = vadd.f32 0.0, %v6298
  %v6300 = vpop.f32.mrf.mxu0
  %6301 = vmatprep.mubr.f32.mxu0 0.0
  %6302 = vmatmul.mubr.f32.gmra.mxu0 %v5993
  %v6303 = vpop.f32.mrf.mxu0
  %v6304 = vadd.f32 0.0, %v6303
  %v6305 = vpop.f32.mrf.mxu0
  %6306 = vmatprep.mubr.f32.mxu0 0.0
  %6307 = vmatmul.mubr.f32.gmra.mxu0 %v5996
  %v6308 = vpop.f32.mrf.mxu0
  %v6309 = vadd.f32 0.0, %v6308
  %v6310 = vpop.f32.mrf.mxu0
  %6311 = vmatprep.mubr.f32.mxu0 0.0
  %6312 = vmatmul.mubr.f32.gmra.mxu0 %v5999
  %v6313 = vpop.f32.mrf.mxu0
  %v6314 = vadd.f32 0.0, %v6313
  %v6315 = vpop.f32.mrf.mxu0
  %6316 = vmatprep.mubr.f32.mxu0 0.0
  %6317 = vmatmul.mubr.f32.gmra.mxu0 %v6002
  %v6318 = vpop.f32.mrf.mxu0
  %v6319 = vadd.f32 0.0, %v6318
  %v6320 = vpop.f32.mrf.mxu0
  %6321 = vmatprep.mubr.f32.mxu0 0.0
  %6322 = vmatmul.mubr.f32.gmra.mxu0 %v6005
  %v6323 = vpop.f32.mrf.mxu0
  %v6324 = vadd.f32 0.0, %v6323
  %v6325 = vpop.f32.mrf.mxu0
  %6326 = vmatprep.mubr.f32.mxu0 0.0
  %6327 = vmatmul.mubr.f32.gmra.mxu0 %v6008
  %v6328 = vpop.f32.mrf.mxu0
  %v6329 = vadd.f32 0.0, %v6328
  %v6330 = vpop.f32.mrf.mxu0
  %6331 = vmatprep.mubr.f32.mxu0 0.0
  %6332 = vmatmul.mubr.f32.gmra.mxu0 %v6011
  %v6333 = vpop.f32.mrf.mxu0
  %v6334 = vadd.f32 0.0, %v6333
  %v6335 = vpop.f32.mrf.mxu0
  %6336 = vmatprep.mubr.f32.mxu0 0.0
  %6337 = vmatmul.mubr.f32.gmra.mxu0 %v6014
  %v6338 = vpop.f32.mrf.mxu0
  %v6339 = vadd.f32 0.0, %v6338
  %v6340 = vpop.f32.mrf.mxu0
  %6341 = vmatprep.mubr.f32.mxu0 0.0
  %6342 = vmatmul.mubr.f32.gmra.mxu0 %v6017
  %v6343 = vpop.f32.mrf.mxu0
  %v6344 = vadd.f32 0.0, %v6343
  %v6345 = vpop.f32.mrf.mxu0
  %6346 = vmatprep.mubr.f32.mxu0 0.0
  %6347 = vmatmul.mubr.f32.gmra.mxu0 %v6020
  %v6348 = vpop.f32.mrf.mxu0
  %v6349 = vadd.f32 0.0, %v6348
  %v6350 = vpop.f32.mrf.mxu0
  %6351 = vmatprep.mubr.f32.mxu0 0.0
  %6352 = vmatmul.mubr.f32.gmra.mxu0 %v6023
  %v6353 = vpop.f32.mrf.mxu0
  %v6354 = vadd.f32 0.0, %v6353
  %v6355 = vpop.f32.mrf.mxu0
  %6356 = vmatprep.mubr.f32.mxu0 0.0
  %6357 = vmatmul.mubr.f32.gmra.mxu0 %v6026
  %v6358 = vpop.f32.mrf.mxu0
  %v6359 = vadd.f32 0.0, %v6358
  %v6360 = vpop.f32.mrf.mxu0
  %6361 = vmatprep.mubr.f32.mxu0 0.0
  %6362 = vmatmul.mubr.f32.gmra.mxu0 %v6029
  %v6363 = vpop.f32.mrf.mxu0
  %v6364 = vadd.f32 0.0, %v6363
  %v6365 = vpop.f32.mrf.mxu0
  %6366 = vmatprep.mubr.f32.mxu0 0.0
  %6367 = vmatmul.mubr.f32.gmra.mxu0 %v6032
  %v6368 = vpop.f32.mrf.mxu0
  %v6369 = vadd.f32 0.0, %v6368
  %v6370 = vpop.f32.mrf.mxu0
  %6371 = vmatprep.mubr.f32.mxu0 0.0
  %6372 = vmatmul.mubr.f32.gmra.mxu0 %v6035
  %v6373 = vpop.f32.mrf.mxu0
  %v6374 = vadd.f32 0.0, %v6373
  %v6375 = vpop.f32.mrf.mxu0
  %6376 = vmatprep.mubr.f32.mxu0 0.0
  %6377 = vmatmul.mubr.f32.gmra.mxu0 %v6038
  %v6378 = vpop.f32.mrf.mxu0
  %v6379 = vadd.f32 0.0, %v6378
  %v6380 = vpop.f32.mrf.mxu0
  %6381 = vmatprep.mubr.f32.mxu0 0.0
  %6382 = vmatmul.mubr.f32.gmra.mxu0 %v6041
  %v6383 = vpop.f32.mrf.mxu0
  %v6384 = vadd.f32 0.0, %v6383
  %v6385 = vpop.f32.mrf.mxu0
  %6386 = vmatprep.mubr.f32.mxu0 0.0
  %6387 = vmatmul.mubr.f32.gmra.mxu0 %v6044
  %v6388 = vpop.f32.mrf.mxu0
  %v6389 = vadd.f32 0.0, %v6388
  %v6390 = vpop.f32.mrf.mxu0
  %6391 = vmatprep.mubr.f32.mxu0 0.0
  %6392 = vmatmul.mubr.f32.gmra.mxu0 %v6047
  %v6393 = vpop.f32.mrf.mxu0
  %v6394 = vadd.f32 0.0, %v6393
  %v6395 = vpop.f32.mrf.mxu0
  %6396 = vmatprep.mubr.f32.mxu0 0.0
  %6397 = vmatmul.mubr.f32.gmra.mxu0 %v6050
  %v6398 = vpop.f32.mrf.mxu0
  %v6399 = vadd.f32 0.0, %v6398
  %v6400 = vpop.f32.mrf.mxu0
  %6401 = vmatprep.mubr.f32.mxu0 0.0
  %6402 = vmatmul.mubr.f32.gmra.mxu0 %v6053
  %v6403 = vpop.f32.mrf.mxu0
  %v6404 = vadd.f32 0.0, %v6403
  %v6405 = vpop.f32.mrf.mxu0
  %6406 = vmatprep.mubr.f32.mxu0 0.0
  %6407 = vmatmul.mubr.f32.gmra.mxu0 %v6056
  %v6408 = vpop.f32.mrf.mxu0
  %v6409 = vadd.f32 0.0, %v6408
  %v6410 = vpop.f32.mrf.mxu0
  %6411 = vmatprep.mubr.f32.mxu0 0.0
  %6412 = vmatmul.mubr.f32.gmra.mxu0 %v6059
  %v6413 = vpop.f32.mrf.mxu0
  %v6414 = vadd.f32 0.0, %v6413
  %v6415 = vpop.f32.mrf.mxu0
  %6416 = vmatprep.mubr.f32.mxu0 0.0
  %6417 = vmatmul.mubr.f32.gmra.mxu0 %v6062
  %v6418 = vpop.f32.mrf.mxu0
  %v6419 = vadd.f32 0.0, %v6418
  %v6420 = vpop.f32.mrf.mxu0
  %6421 = vmatprep.mubr.f32.mxu0 0.0
  %6422 = vmatmul.mubr.f32.gmra.mxu0 %v6065
  %v6423 = vpop.f32.mrf.mxu0
  %v6424 = vadd.f32 0.0, %v6423
  %v6425 = vpop.f32.mrf.mxu0
  %6426 = vmatprep.mubr.f32.mxu0 0.0
  %6427 = vmatmul.mubr.f32.gmra.mxu0 %v6068
  %v6428 = vpop.f32.mrf.mxu0
  %v6429 = vadd.f32 0.0, %v6428
  %v6430 = vpop.f32.mrf.mxu0
  %6431 = vmatprep.mubr.f32.mxu0 0.0
  %6432 = vmatmul.mubr.f32.gmra.mxu0 %v6071
  %v6433 = vpop.f32.mrf.mxu0
  %v6434 = vadd.f32 0.0, %v6433
  %v6435 = vpop.f32.mrf.mxu0
  %6436 = vmatprep.mubr.f32.mxu0 0.0
  %6437 = vmatmul.mubr.f32.gmra.mxu0 %v6074
  %v6438 = vpop.f32.mrf.mxu0
  %v6439 = vadd.f32 0.0, %v6438
  %v6440 = vpop.f32.mrf.mxu0
  %6441 = vmatprep.mubr.f32.mxu0 0.0
  %6442 = vmatmul.mubr.f32.gmra.mxu0 %v6077
  %v6443 = vpop.f32.mrf.mxu0
  %v6444 = vadd.f32 0.0, %v6443
  %v6445 = vpop.f32.mrf.mxu0
  %6446 = vmatprep.mubr.f32.mxu0 0.0
  %6447 = vmatmul.mubr.f32.gmra.mxu0 %v6080
  %v6448 = vpop.f32.mrf.mxu0
  %v6449 = vadd.f32 0.0, %v6448
  %v6450 = vpop.f32.mrf.mxu0
  %6451 = vmatprep.mubr.f32.mxu0 0.0
  %6452 = vmatmul.mubr.f32.gmra.mxu0 %v6083
  %v6453 = vpop.f32.mrf.mxu0
  %v6454 = vadd.f32 0.0, %v6453
  %v6455 = vpop.f32.mrf.mxu0
  %6456 = vmatprep.mubr.f32.mxu0 0.0
  %6457 = vmatmul.mubr.f32.gmra.mxu0 %v6086
  %v6458 = vpop.f32.mrf.mxu0
  %v6459 = vadd.f32 0.0, %v6458
  %v6460 = vpop.f32.mrf.mxu0
  %6461 = vmatprep.mubr.f32.mxu0 0.0
  %6462 = vmatmul.mubr.f32.gmra.mxu0 %v6089
  %v6463 = vpop.f32.mrf.mxu0
  %v6464 = vadd.f32 0.0, %v6463
  %v6465 = vpop.f32.mrf.mxu0
  %6466 = vmatprep.mubr.f32.mxu0 0.0
  %6467 = vmatmul.mubr.f32.gmra.mxu0 %v6092
  %v6468 = vpop.f32.mrf.mxu0
  %v6469 = vadd.f32 0.0, %v6468
  %v6470 = vpop.f32.mrf.mxu0
  %6471 = vmatprep.mubr.f32.mxu0 0.0
  %6472 = vmatmul.mubr.f32.gmra.mxu0 %v6095
  %v6473 = vpop.f32.mrf.mxu0
  %v6474 = vadd.f32 0.0, %v6473
  %v6475 = vpop.f32.mrf.mxu0
  %6476 = vmatprep.mubr.f32.mxu0 0.0
  %6477 = vmatmul.mubr.f32.gmra.mxu0 %v6098
  %v6478 = vpop.f32.mrf.mxu0
  %v6479 = vadd.f32 0.0, %v6478
  %v6480 = vpop.f32.mrf.mxu0
  %6481 = vmatprep.mubr.f32.mxu0 0.0
  %6482 = vmatmul.mubr.f32.gmra.mxu0 %v6101
  %v6483 = vpop.f32.mrf.mxu0
  %v6484 = vadd.f32 0.0, %v6483
  %v6485 = vpop.f32.mrf.mxu0
  %6486 = vmatprep.mubr.f32.mxu0 0.0
  %6487 = vmatmul.mubr.f32.gmra.mxu0 %v6104
  %v6488 = vpop.f32.mrf.mxu0
  %v6489 = vadd.f32 0.0, %v6488
  %v6490 = vpop.f32.mrf.mxu0
  %6491 = vmatprep.mubr.f32.mxu0 0.0
  %6492 = vmatmul.mubr.f32.gmra.mxu0 %v6107
  %v6493 = vpop.f32.mrf.mxu0
  %v6494 = vadd.f32 0.0, %v6493
  %v6495 = vpop.f32.mrf.mxu0
  %6496 = vdwg.mxu0
  %v6497 = vadd.f32 %v5787, %v6179
  %v6498 = vadd.f32 %v5788, %v6184
  %v6499 = vadd.f32 %v5789, %v6189
  %v6500 = vadd.f32 %v5790, %v6194
  %v6501 = vadd.f32 %v5791, %v6199
  %v6502 = vadd.f32 %v5792, %v6204
  %v6503 = vadd.f32 %v5793, %v6209
  %v6504 = vadd.f32 %v5794, %v6214
  %v6505 = vadd.f32 %v5795, %v6219
  %v6506 = vadd.f32 %v5796, %v6224
  %v6507 = vadd.f32 %v5797, %v6229
  %v6508 = vadd.f32 %v5798, %v6234
  %v6509 = vadd.f32 %v5799, %v6239
  %v6510 = vadd.f32 %v5800, %v6244
  %v6511 = vadd.f32 %v5801, %v6249
  %v6512 = vadd.f32 %v5802, %v6254
  %v6513 = vadd.f32 %v5803, %v6259
  %v6514 = vadd.f32 %v5804, %v6264
  %v6515 = vadd.f32 %v5805, %v6269
  %v6516 = vadd.f32 %v5806, %v6274
  %v6517 = vadd.f32 %v5807, %v6279
  %v6518 = vadd.f32 %v5808, %v6284
  %v6519 = vadd.f32 %v5809, %v6289
  %v6520 = vadd.f32 %v5810, %v6294
  %v6521 = vadd.f32 %v5811, %v6299
  %v6522 = vadd.f32 %v5812, %v6304
  %v6523 = vadd.f32 %v5813, %v6309
  %v6524 = vadd.f32 %v5814, %v6314
  %v6525 = vadd.f32 %v5815, %v6319
  %v6526 = vadd.f32 %v5816, %v6324
  %v6527 = vadd.f32 %v5817, %v6329
  %v6528 = vadd.f32 %v5818, %v6334
  %v6529 = vadd.f32 %v5819, %v6339
  %v6530 = vadd.f32 %v5820, %v6344
  %v6531 = vadd.f32 %v5821, %v6349
  %v6532 = vadd.f32 %v5822, %v6354
  %v6533 = vadd.f32 %v5823, %v6359
  %v6534 = vadd.f32 %v5824, %v6364
  %v6535 = vadd.f32 %v5825, %v6369
  %v6536 = vadd.f32 %v5826, %v6374
  %v6537 = vadd.f32 %v5827, %v6379
  %v6538 = vadd.f32 %v5828, %v6384
  %v6539 = vadd.f32 %v5829, %v6389
  %v6540 = vadd.f32 %v5830, %v6394
  %v6541 = vadd.f32 %v5831, %v6399
  %v6542 = vadd.f32 %v5832, %v6404
  %v6543 = vadd.f32 %v5833, %v6409
  %v6544 = vadd.f32 %v5834, %v6414
  %v6545 = vadd.f32 %v5835, %v6419
  %v6546 = vadd.f32 %v5836, %v6424
  %v6547 = vadd.f32 %v5837, %v6429
  %v6548 = vadd.f32 %v5838, %v6434
  %v6549 = vadd.f32 %v5839, %v6439
  %v6550 = vadd.f32 %v5840, %v6444
  %v6551 = vadd.f32 %v5841, %v6449
  %v6552 = vadd.f32 %v5842, %v6454
  %v6553 = vadd.f32 %v5843, %v6459
  %v6554 = vadd.f32 %v5844, %v6464
  %v6555 = vadd.f32 %v5845, %v6469
  %v6556 = vadd.f32 %v5846, %v6474
  %v6557 = vadd.f32 %v5847, %v6479
  %v6558 = vadd.f32 %v5848, %v6484
  %v6559 = vadd.f32 %v5849, %v6489
  %v6560 = vadd.f32 %v5850, %v6494
  %v6561 = vsel %vm79, %v6497, 0.0
  %v6562 = vsel %vm79, %v6498, 0.0
  %v6563 = vadd.f32 %v6561, %v6562
  %v6564 = vsel %vm79, %v6499, 0.0
  %v6565 = vadd.f32 %v6563, %v6564
  %v6566 = vsel %vm79, %v6500, 0.0
  %v6567 = vadd.f32 %v6565, %v6566
  %v6568 = vsel %vm79, %v6501, 0.0
  %v6569 = vadd.f32 %v6567, %v6568
  %v6570 = vsel %vm79, %v6502, 0.0
  %v6571 = vadd.f32 %v6569, %v6570
  %v6572 = vsel %vm79, %v6503, 0.0
  %v6573 = vadd.f32 %v6571, %v6572
  %v6574 = vsel %vm79, %v6504, 0.0
  %v6575 = vadd.f32 %v6573, %v6574
  %v6576 = vsel %vm79, %v6505, 0.0
  %v6577 = vadd.f32 %v6575, %v6576
  %v6578 = vsel %vm79, %v6506, 0.0
  %v6579 = vadd.f32 %v6577, %v6578
  %v6580 = vsel %vm79, %v6507, 0.0
  %v6581 = vadd.f32 %v6579, %v6580
  %v6582 = vsel %vm79, %v6508, 0.0
  %v6583 = vadd.f32 %v6581, %v6582
  %v6584 = vsel %vm79, %v6509, 0.0
  %v6585 = vadd.f32 %v6583, %v6584
  %v6586 = vsel %vm79, %v6510, 0.0
  %v6587 = vadd.f32 %v6585, %v6586
  %v6588 = vsel %vm79, %v6511, 0.0
  %v6589 = vadd.f32 %v6587, %v6588
  %v6590 = vsel %vm79, %v6512, 0.0
  %v6591 = vadd.f32 %v6589, %v6590
  %v6592 = vsel %vm79, %v6513, 0.0
  %v6593 = vadd.f32 %v6591, %v6592
  %v6594 = vsel %vm79, %v6514, 0.0
  %v6595 = vadd.f32 %v6593, %v6594
  %v6596 = vsel %vm79, %v6515, 0.0
  %v6597 = vadd.f32 %v6595, %v6596
  %v6598 = vsel %vm79, %v6516, 0.0
  %v6599 = vadd.f32 %v6597, %v6598
  %v6600 = vsel %vm79, %v6517, 0.0
  %v6601 = vadd.f32 %v6599, %v6600
  %v6602 = vsel %vm79, %v6518, 0.0
  %v6603 = vadd.f32 %v6601, %v6602
  %v6604 = vsel %vm79, %v6519, 0.0
  %v6605 = vadd.f32 %v6603, %v6604
  %v6606 = vsel %vm79, %v6520, 0.0
  %v6607 = vadd.f32 %v6605, %v6606
  %v6608 = vsel %vm79, %v6521, 0.0
  %v6609 = vadd.f32 %v6607, %v6608
  %v6610 = vsel %vm79, %v6522, 0.0
  %v6611 = vadd.f32 %v6609, %v6610
  %v6612 = vsel %vm79, %v6523, 0.0
  %v6613 = vadd.f32 %v6611, %v6612
  %v6614 = vsel %vm79, %v6524, 0.0
  %v6615 = vadd.f32 %v6613, %v6614
  %v6616 = vsel %vm79, %v6525, 0.0
  %v6617 = vadd.f32 %v6615, %v6616
  %v6618 = vsel %vm79, %v6526, 0.0
  %v6619 = vadd.f32 %v6617, %v6618
  %v6620 = vsel %vm79, %v6527, 0.0
  %v6621 = vadd.f32 %v6619, %v6620
  %v6622 = vsel %vm79, %v6528, 0.0
  %v6623 = vadd.f32 %v6621, %v6622
  %v6624 = vrot.slane %v6623, 4
  %v6625 = vadd.f32 %v6623, %v6624
  %v6626 = vrot.slane %v6625, 2
  %v6627 = vadd.f32 %v6625, %v6626
  %v6628 = vrot.slane %v6627, 1
  %v6629 = vadd.f32 %v6627, %v6628
  %v6630 = vsel %vm79, %v6529, 0.0
  %v6631 = vsel %vm79, %v6530, 0.0
  %v6632 = vadd.f32 %v6630, %v6631
  %v6633 = vsel %vm79, %v6531, 0.0
  %v6634 = vadd.f32 %v6632, %v6633
  %v6635 = vsel %vm79, %v6532, 0.0
  %v6636 = vadd.f32 %v6634, %v6635
  %v6637 = vsel %vm79, %v6533, 0.0
  %v6638 = vadd.f32 %v6636, %v6637
  %v6639 = vsel %vm79, %v6534, 0.0
  %v6640 = vadd.f32 %v6638, %v6639
  %v6641 = vsel %vm79, %v6535, 0.0
  %v6642 = vadd.f32 %v6640, %v6641
  %v6643 = vsel %vm79, %v6536, 0.0
  %v6644 = vadd.f32 %v6642, %v6643
  %v6645 = vsel %vm79, %v6537, 0.0
  %v6646 = vadd.f32 %v6644, %v6645
  %v6647 = vsel %vm79, %v6538, 0.0
  %v6648 = vadd.f32 %v6646, %v6647
  %v6649 = vsel %vm79, %v6539, 0.0
  %v6650 = vadd.f32 %v6648, %v6649
  %v6651 = vsel %vm79, %v6540, 0.0
  %v6652 = vadd.f32 %v6650, %v6651
  %v6653 = vsel %vm79, %v6541, 0.0
  %v6654 = vadd.f32 %v6652, %v6653
  %v6655 = vsel %vm79, %v6542, 0.0
  %v6656 = vadd.f32 %v6654, %v6655
  %v6657 = vsel %vm79, %v6543, 0.0
  %v6658 = vadd.f32 %v6656, %v6657
  %v6659 = vsel %vm79, %v6544, 0.0
  %v6660 = vadd.f32 %v6658, %v6659
  %v6661 = vsel %vm79, %v6545, 0.0
  %v6662 = vadd.f32 %v6660, %v6661
  %v6663 = vsel %vm79, %v6546, 0.0
  %v6664 = vadd.f32 %v6662, %v6663
  %v6665 = vsel %vm79, %v6547, 0.0
  %v6666 = vadd.f32 %v6664, %v6665
  %v6667 = vsel %vm79, %v6548, 0.0
  %v6668 = vadd.f32 %v6666, %v6667
  %v6669 = vsel %vm79, %v6549, 0.0
  %v6670 = vadd.f32 %v6668, %v6669
  %v6671 = vsel %vm79, %v6550, 0.0
  %v6672 = vadd.f32 %v6670, %v6671
  %v6673 = vsel %vm79, %v6551, 0.0
  %v6674 = vadd.f32 %v6672, %v6673
  %v6675 = vsel %vm79, %v6552, 0.0
  %v6676 = vadd.f32 %v6674, %v6675
  %v6677 = vsel %vm79, %v6553, 0.0
  %v6678 = vadd.f32 %v6676, %v6677
  %v6679 = vsel %vm79, %v6554, 0.0
  %v6680 = vadd.f32 %v6678, %v6679
  %v6681 = vsel %vm79, %v6555, 0.0
  %v6682 = vadd.f32 %v6680, %v6681
  %v6683 = vsel %vm79, %v6556, 0.0
  %v6684 = vadd.f32 %v6682, %v6683
  %v6685 = vsel %vm79, %v6557, 0.0
  %v6686 = vadd.f32 %v6684, %v6685
  %v6687 = vsel %vm79, %v6558, 0.0
  %v6688 = vadd.f32 %v6686, %v6687
  %v6689 = vsel %vm79, %v6559, 0.0
  %v6690 = vadd.f32 %v6688, %v6689
  %v6691 = vsel %vm79, %v6560, 0.0
  %v6692 = vadd.f32 %v6690, %v6691
  %v6693 = vrot.slane %v6692, 4
  %v6694 = vadd.f32 %v6692, %v6693
  %v6695 = vrot.slane %v6694, 2
  %v6696 = vadd.f32 %v6694, %v6695
  %v6697 = vrot.slane %v6696, 1
  %v6698 = vadd.f32 %v6696, %v6697
  %v6699 = vrcp.pop 256.0
  %v6700 = vmul.f32 %v6629, %v6699
  %v6701 = vmul.f32 %v6698, %v6699
  %v6702 = vsub.f32 %v6497, %v6700
  %v6703 = vsub.f32 %v6498, %v6700
  %v6704 = vsub.f32 %v6499, %v6700
  %v6705 = vsub.f32 %v6500, %v6700
  %v6706 = vsub.f32 %v6501, %v6700
  %v6707 = vsub.f32 %v6502, %v6700
  %v6708 = vsub.f32 %v6503, %v6700
  %v6709 = vsub.f32 %v6504, %v6700
  %v6710 = vsub.f32 %v6505, %v6700
  %v6711 = vsub.f32 %v6506, %v6700
  %v6712 = vsub.f32 %v6507, %v6700
  %v6713 = vsub.f32 %v6508, %v6700
  %v6714 = vsub.f32 %v6509, %v6700
  %v6715 = vsub.f32 %v6510, %v6700
  %v6716 = vsub.f32 %v6511, %v6700
  %v6717 = vsub.f32 %v6512, %v6700
  %v6718 = vsub.f32 %v6513, %v6700
  %v6719 = vsub.f32 %v6514, %v6700
  %v6720 = vsub.f32 %v6515, %v6700
  %v6721 = vsub.f32 %v6516, %v6700
  %v6722 = vsub.f32 %v6517, %v6700
  %v6723 = vsub.f32 %v6518, %v6700
  %v6724 = vsub.f32 %v6519, %v6700
  %v6725 = vsub.f32 %v6520, %v6700
  %v6726 = vsub.f32 %v6521, %v6700
  %v6727 = vsub.f32 %v6522, %v6700
  %v6728 = vsub.f32 %v6523, %v6700
  %v6729 = vsub.f32 %v6524, %v6700
  %v6730 = vsub.f32 %v6525, %v6700
  %v6731 = vsub.f32 %v6526, %v6700
  %v6732 = vsub.f32 %v6527, %v6700
  %v6733 = vsub.f32 %v6528, %v6700
  %v6734 = vsub.f32 %v6529, %v6701
  %v6735 = vsub.f32 %v6530, %v6701
  %v6736 = vsub.f32 %v6531, %v6701
  %v6737 = vsub.f32 %v6532, %v6701
  %v6738 = vsub.f32 %v6533, %v6701
  %v6739 = vsub.f32 %v6534, %v6701
  %v6740 = vsub.f32 %v6535, %v6701
  %v6741 = vsub.f32 %v6536, %v6701
  %v6742 = vsub.f32 %v6537, %v6701
  %v6743 = vsub.f32 %v6538, %v6701
  %v6744 = vsub.f32 %v6539, %v6701
  %v6745 = vsub.f32 %v6540, %v6701
  %v6746 = vsub.f32 %v6541, %v6701
  %v6747 = vsub.f32 %v6542, %v6701
  %v6748 = vsub.f32 %v6543, %v6701
  %v6749 = vsub.f32 %v6544, %v6701
  %v6750 = vsub.f32 %v6545, %v6701
  %v6751 = vsub.f32 %v6546, %v6701
  %v6752 = vsub.f32 %v6547, %v6701
  %v6753 = vsub.f32 %v6548, %v6701
  %v6754 = vsub.f32 %v6549, %v6701
  %v6755 = vsub.f32 %v6550, %v6701
  %v6756 = vsub.f32 %v6551, %v6701
  %v6757 = vsub.f32 %v6552, %v6701
  %v6758 = vsub.f32 %v6553, %v6701
  %v6759 = vsub.f32 %v6554, %v6701
  %v6760 = vsub.f32 %v6555, %v6701
  %v6761 = vsub.f32 %v6556, %v6701
  %v6762 = vsub.f32 %v6557, %v6701
  %v6763 = vsub.f32 %v6558, %v6701
  %v6764 = vsub.f32 %v6559, %v6701
  %v6765 = vsub.f32 %v6560, %v6701
  %v6766 = vmul.f32 %v6702, %v6702
  %v6767 = vmul.f32 %v6703, %v6703
  %v6768 = vmul.f32 %v6704, %v6704
  %v6769 = vmul.f32 %v6705, %v6705
  %v6770 = vmul.f32 %v6706, %v6706
  %v6771 = vmul.f32 %v6707, %v6707
  %v6772 = vmul.f32 %v6708, %v6708
  %v6773 = vmul.f32 %v6709, %v6709
  %v6774 = vmul.f32 %v6710, %v6710
  %v6775 = vmul.f32 %v6711, %v6711
  %v6776 = vmul.f32 %v6712, %v6712
  %v6777 = vmul.f32 %v6713, %v6713
  %v6778 = vmul.f32 %v6714, %v6714
  %v6779 = vmul.f32 %v6715, %v6715
  %v6780 = vmul.f32 %v6716, %v6716
  %v6781 = vmul.f32 %v6717, %v6717
  %v6782 = vmul.f32 %v6718, %v6718
  %v6783 = vmul.f32 %v6719, %v6719
  %v6784 = vmul.f32 %v6720, %v6720
  %v6785 = vmul.f32 %v6721, %v6721
  %v6786 = vmul.f32 %v6722, %v6722
  %v6787 = vmul.f32 %v6723, %v6723
  %v6788 = vmul.f32 %v6724, %v6724
  %v6789 = vmul.f32 %v6725, %v6725
  %v6790 = vmul.f32 %v6726, %v6726
  %v6791 = vmul.f32 %v6727, %v6727
  %v6792 = vmul.f32 %v6728, %v6728
  %v6793 = vmul.f32 %v6729, %v6729
  %v6794 = vmul.f32 %v6730, %v6730
  %v6795 = vmul.f32 %v6731, %v6731
  %v6796 = vmul.f32 %v6732, %v6732
  %v6797 = vmul.f32 %v6733, %v6733
  %v6798 = vmul.f32 %v6734, %v6734
  %v6799 = vmul.f32 %v6735, %v6735
  %v6800 = vmul.f32 %v6736, %v6736
  %v6801 = vmul.f32 %v6737, %v6737
  %v6802 = vmul.f32 %v6738, %v6738
  %v6803 = vmul.f32 %v6739, %v6739
  %v6804 = vmul.f32 %v6740, %v6740
  %v6805 = vmul.f32 %v6741, %v6741
  %v6806 = vmul.f32 %v6742, %v6742
  %v6807 = vmul.f32 %v6743, %v6743
  %v6808 = vmul.f32 %v6744, %v6744
  %v6809 = vmul.f32 %v6745, %v6745
  %v6810 = vmul.f32 %v6746, %v6746
  %v6811 = vmul.f32 %v6747, %v6747
  %v6812 = vmul.f32 %v6748, %v6748
  %v6813 = vmul.f32 %v6749, %v6749
  %v6814 = vmul.f32 %v6750, %v6750
  %v6815 = vmul.f32 %v6751, %v6751
  %v6816 = vmul.f32 %v6752, %v6752
  %v6817 = vmul.f32 %v6753, %v6753
  %v6818 = vmul.f32 %v6754, %v6754
  %v6819 = vmul.f32 %v6755, %v6755
  %v6820 = vmul.f32 %v6756, %v6756
  %v6821 = vmul.f32 %v6757, %v6757
  %v6822 = vmul.f32 %v6758, %v6758
  %v6823 = vmul.f32 %v6759, %v6759
  %v6824 = vmul.f32 %v6760, %v6760
  %v6825 = vmul.f32 %v6761, %v6761
  %v6826 = vmul.f32 %v6762, %v6762
  %v6827 = vmul.f32 %v6763, %v6763
  %v6828 = vmul.f32 %v6764, %v6764
  %v6829 = vmul.f32 %v6765, %v6765
  %v6830 = vsel %vm79, %v6766, 0.0
  %v6831 = vsel %vm79, %v6767, 0.0
  %v6832 = vadd.f32 %v6830, %v6831
  %v6833 = vsel %vm79, %v6768, 0.0
  %v6834 = vadd.f32 %v6832, %v6833
  %v6835 = vsel %vm79, %v6769, 0.0
  %v6836 = vadd.f32 %v6834, %v6835
  %v6837 = vsel %vm79, %v6770, 0.0
  %v6838 = vadd.f32 %v6836, %v6837
  %v6839 = vsel %vm79, %v6771, 0.0
  %v6840 = vadd.f32 %v6838, %v6839
  %v6841 = vsel %vm79, %v6772, 0.0
  %v6842 = vadd.f32 %v6840, %v6841
  %v6843 = vsel %vm79, %v6773, 0.0
  %v6844 = vadd.f32 %v6842, %v6843
  %v6845 = vsel %vm79, %v6774, 0.0
  %v6846 = vadd.f32 %v6844, %v6845
  %v6847 = vsel %vm79, %v6775, 0.0
  %v6848 = vadd.f32 %v6846, %v6847
  %v6849 = vsel %vm79, %v6776, 0.0
  %v6850 = vadd.f32 %v6848, %v6849
  %v6851 = vsel %vm79, %v6777, 0.0
  %v6852 = vadd.f32 %v6850, %v6851
  %v6853 = vsel %vm79, %v6778, 0.0
  %v6854 = vadd.f32 %v6852, %v6853
  %v6855 = vsel %vm79, %v6779, 0.0
  %v6856 = vadd.f32 %v6854, %v6855
  %v6857 = vsel %vm79, %v6780, 0.0
  %v6858 = vadd.f32 %v6856, %v6857
  %v6859 = vsel %vm79, %v6781, 0.0
  %v6860 = vadd.f32 %v6858, %v6859
  %v6861 = vsel %vm79, %v6782, 0.0
  %v6862 = vadd.f32 %v6860, %v6861
  %v6863 = vsel %vm79, %v6783, 0.0
  %v6864 = vadd.f32 %v6862, %v6863
  %v6865 = vsel %vm79, %v6784, 0.0
  %v6866 = vadd.f32 %v6864, %v6865
  %v6867 = vsel %vm79, %v6785, 0.0
  %v6868 = vadd.f32 %v6866, %v6867
  %v6869 = vsel %vm79, %v6786, 0.0
  %v6870 = vadd.f32 %v6868, %v6869
  %v6871 = vsel %vm79, %v6787, 0.0
  %v6872 = vadd.f32 %v6870, %v6871
  %v6873 = vsel %vm79, %v6788, 0.0
  %v6874 = vadd.f32 %v6872, %v6873
  %v6875 = vsel %vm79, %v6789, 0.0
  %v6876 = vadd.f32 %v6874, %v6875
  %v6877 = vsel %vm79, %v6790, 0.0
  %v6878 = vadd.f32 %v6876, %v6877
  %v6879 = vsel %vm79, %v6791, 0.0
  %v6880 = vadd.f32 %v6878, %v6879
  %v6881 = vsel %vm79, %v6792, 0.0
  %v6882 = vadd.f32 %v6880, %v6881
  %v6883 = vsel %vm79, %v6793, 0.0
  %v6884 = vadd.f32 %v6882, %v6883
  %v6885 = vsel %vm79, %v6794, 0.0
  %v6886 = vadd.f32 %v6884, %v6885
  %v6887 = vsel %vm79, %v6795, 0.0
  %v6888 = vadd.f32 %v6886, %v6887
  %v6889 = vsel %vm79, %v6796, 0.0
  %v6890 = vadd.f32 %v6888, %v6889
  %v6891 = vsel %vm79, %v6797, 0.0
  %v6892 = vadd.f32 %v6890, %v6891
  %v6893 = vrot.slane %v6892, 4
  %v6894 = vadd.f32 %v6892, %v6893
  %v6895 = vrot.slane %v6894, 2
  %v6896 = vadd.f32 %v6894, %v6895
  %v6897 = vrot.slane %v6896, 1
  %v6898 = vadd.f32 %v6896, %v6897
  %v6899 = vsel %vm79, %v6798, 0.0
  %v6900 = vsel %vm79, %v6799, 0.0
  %v6901 = vadd.f32 %v6899, %v6900
  %v6902 = vsel %vm79, %v6800, 0.0
  %v6903 = vadd.f32 %v6901, %v6902
  %v6904 = vsel %vm79, %v6801, 0.0
  %v6905 = vadd.f32 %v6903, %v6904
  %v6906 = vsel %vm79, %v6802, 0.0
  %v6907 = vadd.f32 %v6905, %v6906
  %v6908 = vsel %vm79, %v6803, 0.0
  %v6909 = vadd.f32 %v6907, %v6908
  %v6910 = vsel %vm79, %v6804, 0.0
  %v6911 = vadd.f32 %v6909, %v6910
  %v6912 = vsel %vm79, %v6805, 0.0
  %v6913 = vadd.f32 %v6911, %v6912
  %v6914 = vsel %vm79, %v6806, 0.0
  %v6915 = vadd.f32 %v6913, %v6914
  %v6916 = vsel %vm79, %v6807, 0.0
  %v6917 = vadd.f32 %v6915, %v6916
  %v6918 = vsel %vm79, %v6808, 0.0
  %v6919 = vadd.f32 %v6917, %v6918
  %v6920 = vsel %vm79, %v6809, 0.0
  %v6921 = vadd.f32 %v6919, %v6920
  %v6922 = vsel %vm79, %v6810, 0.0
  %v6923 = vadd.f32 %v6921, %v6922
  %v6924 = vsel %vm79, %v6811, 0.0
  %v6925 = vadd.f32 %v6923, %v6924
  %v6926 = vsel %vm79, %v6812, 0.0
  %v6927 = vadd.f32 %v6925, %v6926
  %v6928 = vsel %vm79, %v6813, 0.0
  %v6929 = vadd.f32 %v6927, %v6928
  %v6930 = vsel %vm79, %v6814, 0.0
  %v6931 = vadd.f32 %v6929, %v6930
  %v6932 = vsel %vm79, %v6815, 0.0
  %v6933 = vadd.f32 %v6931, %v6932
  %v6934 = vsel %vm79, %v6816, 0.0
  %v6935 = vadd.f32 %v6933, %v6934
  %v6936 = vsel %vm79, %v6817, 0.0
  %v6937 = vadd.f32 %v6935, %v6936
  %v6938 = vsel %vm79, %v6818, 0.0
  %v6939 = vadd.f32 %v6937, %v6938
  %v6940 = vsel %vm79, %v6819, 0.0
  %v6941 = vadd.f32 %v6939, %v6940
  %v6942 = vsel %vm79, %v6820, 0.0
  %v6943 = vadd.f32 %v6941, %v6942
  %v6944 = vsel %vm79, %v6821, 0.0
  %v6945 = vadd.f32 %v6943, %v6944
  %v6946 = vsel %vm79, %v6822, 0.0
  %v6947 = vadd.f32 %v6945, %v6946
  %v6948 = vsel %vm79, %v6823, 0.0
  %v6949 = vadd.f32 %v6947, %v6948
  %v6950 = vsel %vm79, %v6824, 0.0
  %v6951 = vadd.f32 %v6949, %v6950
  %v6952 = vsel %vm79, %v6825, 0.0
  %v6953 = vadd.f32 %v6951, %v6952
  %v6954 = vsel %vm79, %v6826, 0.0
  %v6955 = vadd.f32 %v6953, %v6954
  %v6956 = vsel %vm79, %v6827, 0.0
  %v6957 = vadd.f32 %v6955, %v6956
  %v6958 = vsel %vm79, %v6828, 0.0
  %v6959 = vadd.f32 %v6957, %v6958
  %v6960 = vsel %vm79, %v6829, 0.0
  %v6961 = vadd.f32 %v6959, %v6960
  %v6962 = vrot.slane %v6961, 4
  %v6963 = vadd.f32 %v6961, %v6962
  %v6964 = vrot.slane %v6963, 2
  %v6965 = vadd.f32 %v6963, %v6964
  %v6966 = vrot.slane %v6965, 1
  %v6967 = vadd.f32 %v6965, %v6966
  %v6968 = vmul.f32 %v6898, %v6699
  %v6969 = vmul.f32 %v6967, %v6699
  %v6970 = vadd.f32 %v6968, 1e-05
  %v6971 = vadd.f32 %v6969, 1e-05
  %v6972 = vrsqrt.pop %v6970
  %v6973 = vrsqrt.pop %v6971
  %v6974 = vmul.f32 %v6702, %v6972
  %v6975 = vmul.f32 %v6703, %v6972
  %v6976 = vmul.f32 %v6704, %v6972
  %v6977 = vmul.f32 %v6705, %v6972
  %v6978 = vmul.f32 %v6706, %v6972
  %v6979 = vmul.f32 %v6707, %v6972
  %v6980 = vmul.f32 %v6708, %v6972
  %v6981 = vmul.f32 %v6709, %v6972
  %v6982 = vmul.f32 %v6710, %v6972
  %v6983 = vmul.f32 %v6711, %v6972
  %v6984 = vmul.f32 %v6712, %v6972
  %v6985 = vmul.f32 %v6713, %v6972
  %v6986 = vmul.f32 %v6714, %v6972
  %v6987 = vmul.f32 %v6715, %v6972
  %v6988 = vmul.f32 %v6716, %v6972
  %v6989 = vmul.f32 %v6717, %v6972
  %v6990 = vmul.f32 %v6718, %v6972
  %v6991 = vmul.f32 %v6719, %v6972
  %v6992 = vmul.f32 %v6720, %v6972
  %v6993 = vmul.f32 %v6721, %v6972
  %v6994 = vmul.f32 %v6722, %v6972
  %v6995 = vmul.f32 %v6723, %v6972
  %v6996 = vmul.f32 %v6724, %v6972
  %v6997 = vmul.f32 %v6725, %v6972
  %v6998 = vmul.f32 %v6726, %v6972
  %v6999 = vmul.f32 %v6727, %v6972
  %v7000 = vmul.f32 %v6728, %v6972
  %v7001 = vmul.f32 %v6729, %v6972
  %v7002 = vmul.f32 %v6730, %v6972
  %v7003 = vmul.f32 %v6731, %v6972
  %v7004 = vmul.f32 %v6732, %v6972
  %v7005 = vmul.f32 %v6733, %v6972
  %v7006 = vmul.f32 %v6734, %v6973
  %v7007 = vmul.f32 %v6735, %v6973
  %v7008 = vmul.f32 %v6736, %v6973
  %v7009 = vmul.f32 %v6737, %v6973
  %v7010 = vmul.f32 %v6738, %v6973
  %v7011 = vmul.f32 %v6739, %v6973
  %v7012 = vmul.f32 %v6740, %v6973
  %v7013 = vmul.f32 %v6741, %v6973
  %v7014 = vmul.f32 %v6742, %v6973
  %v7015 = vmul.f32 %v6743, %v6973
  %v7016 = vmul.f32 %v6744, %v6973
  %v7017 = vmul.f32 %v6745, %v6973
  %v7018 = vmul.f32 %v6746, %v6973
  %v7019 = vmul.f32 %v6747, %v6973
  %v7020 = vmul.f32 %v6748, %v6973
  %v7021 = vmul.f32 %v6749, %v6973
  %v7022 = vmul.f32 %v6750, %v6973
  %v7023 = vmul.f32 %v6751, %v6973
  %v7024 = vmul.f32 %v6752, %v6973
  %v7025 = vmul.f32 %v6753, %v6973
  %v7026 = vmul.f32 %v6754, %v6973
  %v7027 = vmul.f32 %v6755, %v6973
  %v7028 = vmul.f32 %v6756, %v6973
  %v7029 = vmul.f32 %v6757, %v6973
  %v7030 = vmul.f32 %v6758, %v6973
  %v7031 = vmul.f32 %v6759, %v6973
  %v7032 = vmul.f32 %v6760, %v6973
  %v7033 = vmul.f32 %v6761, %v6973
  %v7034 = vmul.f32 %v6762, %v6973
  %v7035 = vmul.f32 %v6763, %v6973
  %v7036 = vmul.f32 %v6764, %v6973
  %v7037 = vmul.f32 %v6765, %v6973
  %v7038 = vmax.f32 %v6974, 0.0
  %v7039 = vmax.f32 %v6975, 0.0
  %v7040 = vmax.f32 %v6976, 0.0
  %v7041 = vmax.f32 %v6977, 0.0
  %v7042 = vmax.f32 %v6978, 0.0
  %v7043 = vmax.f32 %v6979, 0.0
  %v7044 = vmax.f32 %v6980, 0.0
  %v7045 = vmax.f32 %v6981, 0.0
  %v7046 = vmax.f32 %v6982, 0.0
  %v7047 = vmax.f32 %v6983, 0.0
  %v7048 = vmax.f32 %v6984, 0.0
  %v7049 = vmax.f32 %v6985, 0.0
  %v7050 = vmax.f32 %v6986, 0.0
  %v7051 = vmax.f32 %v6987, 0.0
  %v7052 = vmax.f32 %v6988, 0.0
  %v7053 = vmax.f32 %v6989, 0.0
  %v7054 = vmax.f32 %v6990, 0.0
  %v7055 = vmax.f32 %v6991, 0.0
  %v7056 = vmax.f32 %v6992, 0.0
  %v7057 = vmax.f32 %v6993, 0.0
  %v7058 = vmax.f32 %v6994, 0.0
  %v7059 = vmax.f32 %v6995, 0.0
  %v7060 = vmax.f32 %v6996, 0.0
  %v7061 = vmax.f32 %v6997, 0.0
  %v7062 = vmax.f32 %v6998, 0.0
  %v7063 = vmax.f32 %v6999, 0.0
  %v7064 = vmax.f32 %v7000, 0.0
  %v7065 = vmax.f32 %v7001, 0.0
  %v7066 = vmax.f32 %v7002, 0.0
  %v7067 = vmax.f32 %v7003, 0.0
  %v7068 = vmax.f32 %v7004, 0.0
  %v7069 = vmax.f32 %v7005, 0.0
  %v7070 = vmax.f32 %v7006, 0.0
  %v7071 = vmax.f32 %v7007, 0.0
  %v7072 = vmax.f32 %v7008, 0.0
  %v7073 = vmax.f32 %v7009, 0.0
  %v7074 = vmax.f32 %v7010, 0.0
  %v7075 = vmax.f32 %v7011, 0.0
  %v7076 = vmax.f32 %v7012, 0.0
  %v7077 = vmax.f32 %v7013, 0.0
  %v7078 = vmax.f32 %v7014, 0.0
  %v7079 = vmax.f32 %v7015, 0.0
  %v7080 = vmax.f32 %v7016, 0.0
  %v7081 = vmax.f32 %v7017, 0.0
  %v7082 = vmax.f32 %v7018, 0.0
  %v7083 = vmax.f32 %v7019, 0.0
  %v7084 = vmax.f32 %v7020, 0.0
  %v7085 = vmax.f32 %v7021, 0.0
  %v7086 = vmax.f32 %v7022, 0.0
  %v7087 = vmax.f32 %v7023, 0.0
  %v7088 = vmax.f32 %v7024, 0.0
  %v7089 = vmax.f32 %v7025, 0.0
  %v7090 = vmax.f32 %v7026, 0.0
  %v7091 = vmax.f32 %v7027, 0.0
  %v7092 = vmax.f32 %v7028, 0.0
  %v7093 = vmax.f32 %v7029, 0.0
  %v7094 = vmax.f32 %v7030, 0.0
  %v7095 = vmax.f32 %v7031, 0.0
  %v7096 = vmax.f32 %v7032, 0.0
  %v7097 = vmax.f32 %v7033, 0.0
  %v7098 = vmax.f32 %v7034, 0.0
  %v7099 = vmax.f32 %v7035, 0.0
  %v7100 = vmax.f32 %v7036, 0.0
  %v7101 = vmax.f32 %v7037, 0.0
  %7102 = vst.msk [vmem:[%s78 + $0x1] sm:$0xff] %vm79, %v7038
  %7103 = vst.msk [vmem:[%s78 + $0x9] sm:$0xff] %vm79, %v7039
  %7104 = vst.msk [vmem:[%s78 + $0x19] sm:$0xff] %vm79, %v7040
  %7105 = vst.msk [vmem:[%s78 + $0x21] sm:$0xff] %vm79, %v7041
  %7106 = vst.msk [vmem:[%s78 + $0x31] sm:$0xff] %vm79, %v7042
  %7107 = vst.msk [vmem:[%s78 + $0x39] sm:$0xff] %vm79, %v7043
  %7108 = vst.msk [vmem:[%s78 + $0x49] sm:$0xff] %vm79, %v7044
  %7109 = vst.msk [vmem:[%s78 + $0x51] sm:$0xff] %vm79, %v7045
  %7110 = vst.msk [vmem:[%s78 + $0x61] sm:$0xff] %vm79, %v7046
  %7111 = vst.msk [vmem:[%s78 + $0x69] sm:$0xff] %vm79, %v7047
  %7112 = vst.msk [vmem:[%s78 + $0x79] sm:$0xff] %vm79, %v7048
  %7113 = vst.msk [vmem:[%s78 + $0x81] sm:$0xff] %vm79, %v7049
  %7114 = vst.msk [vmem:[%s78 + $0x91] sm:$0xff] %vm79, %v7050
  %7115 = vst.msk [vmem:[%s78 + $0x99] sm:$0xff] %vm79, %v7051
  %7116 = vst.msk [vmem:[%s78 + $0xa9] sm:$0xff] %vm79, %v7052
  %7117 = vst.msk [vmem:[%s78 + $0xb1] sm:$0xff] %vm79, %v7053
  %7118 = vst.msk [vmem:[%s78 + $0xc1] sm:$0xff] %vm79, %v7054
  %7119 = vst.msk [vmem:[%s78 + $0xc9] sm:$0xff] %vm79, %v7055
  %7120 = vst.msk [vmem:[%s78 + $0xd9] sm:$0xff] %vm79, %v7056
  %7121 = vst.msk [vmem:[%s78 + $0xe1] sm:$0xff] %vm79, %v7057
  %7122 = vst.msk [vmem:[%s78 + $0xf1] sm:$0xff] %vm79, %v7058
  %7123 = vst.msk [vmem:[%s78 + $0xf9] sm:$0xff] %vm79, %v7059
  %7124 = vst.msk [vmem:[%s78 + $0x109] sm:$0xff] %vm79, %v7060
  %7125 = vst.msk [vmem:[%s78 + $0x111] sm:$0xff] %vm79, %v7061
  %7126 = vst.msk [vmem:[%s78 + $0x121] sm:$0xff] %vm79, %v7062
  %7127 = vst.msk [vmem:[%s78 + $0x129] sm:$0xff] %vm79, %v7063
  %7128 = vst.msk [vmem:[%s78 + $0x139] sm:$0xff] %vm79, %v7064
  %7129 = vst.msk [vmem:[%s78 + $0x141] sm:$0xff] %vm79, %v7065
  %7130 = vst.msk [vmem:[%s78 + $0x151] sm:$0xff] %vm79, %v7066
  %7131 = vst.msk [vmem:[%s78 + $0x159] sm:$0xff] %vm79, %v7067
  %7132 = vst.msk [vmem:[%s78 + $0x169] sm:$0xff] %vm79, %v7068
  %7133 = vst.msk [vmem:[%s78 + $0x171] sm:$0xff] %vm79, %v7069
  %7134 = vst.msk [vmem:[%s78 + $0x1b1] sm:$0xff] %vm79, %v7070
  %7135 = vst.msk [vmem:[%s78 + $0x1b9] sm:$0xff] %vm79, %v7071
  %7136 = vst.msk [vmem:[%s78 + $0x1c9] sm:$0xff] %vm79, %v7072
  %7137 = vst.msk [vmem:[%s78 + $0x1d1] sm:$0xff] %vm79, %v7073
  %7138 = vst.msk [vmem:[%s78 + $0x1e1] sm:$0xff] %vm79, %v7074
  %7139 = vst.msk [vmem:[%s78 + $0x1e9] sm:$0xff] %vm79, %v7075
  %7140 = vst.msk [vmem:[%s78 + $0x1f9] sm:$0xff] %vm79, %v7076
  %7141 = vst.msk [vmem:[%s78 + $0x201] sm:$0xff] %vm79, %v7077
  %7142 = vst.msk [vmem:[%s78 + $0x211] sm:$0xff] %vm79, %v7078
  %7143 = vst.msk [vmem:[%s78 + $0x219] sm:$0xff] %vm79, %v7079
  %7144 = vst.msk [vmem:[%s78 + $0x229] sm:$0xff] %vm79, %v7080
  %7145 = vst.msk [vmem:[%s78 + $0x231] sm:$0xff] %vm79, %v7081
  %7146 = vst.msk [vmem:[%s78 + $0x241] sm:$0xff] %vm79, %v7082
  %7147 = vst.msk [vmem:[%s78 + $0x249] sm:$0xff] %vm79, %v7083
  %7148 = vst.msk [vmem:[%s78 + $0x259] sm:$0xff] %vm79, %v7084
  %7149 = vst.msk [vmem:[%s78 + $0x261] sm:$0xff] %vm79, %v7085
  %7150 = vst.msk [vmem:[%s78 + $0x271] sm:$0xff] %vm79, %v7086
  %7151 = vst.msk [vmem:[%s78 + $0x279] sm:$0xff] %vm79, %v7087
  %7152 = vst.msk [vmem:[%s78 + $0x289] sm:$0xff] %vm79, %v7088
  %7153 = vst.msk [vmem:[%s78 + $0x291] sm:$0xff] %vm79, %v7089
  %7154 = vst.msk [vmem:[%s78 + $0x2a1] sm:$0xff] %vm79, %v7090
  %7155 = vst.msk [vmem:[%s78 + $0x2a9] sm:$0xff] %vm79, %v7091
  %7156 = vst.msk [vmem:[%s78 + $0x2b9] sm:$0xff] %vm79, %v7092
  %7157 = vst.msk [vmem:[%s78 + $0x2c1] sm:$0xff] %vm79, %v7093
  %7158 = vst.msk [vmem:[%s78 + $0x2d1] sm:$0xff] %vm79, %v7094
  %7159 = vst.msk [vmem:[%s78 + $0x2d9] sm:$0xff] %vm79, %v7095
  %7160 = vst.msk [vmem:[%s78 + $0x2e9] sm:$0xff] %vm79, %v7096
  %7161 = vst.msk [vmem:[%s78 + $0x2f1] sm:$0xff] %vm79, %v7097
  %7162 = vst.msk [vmem:[%s78 + $0x301] sm:$0xff] %vm79, %v7098
  %7163 = vst.msk [vmem:[%s78 + $0x309] sm:$0xff] %vm79, %v7099
  %7164 = vst.msk [vmem:[%s78 + $0x319] sm:$0xff] %vm79, %v7100
  %7165 = vst.msk [vmem:[%s78 + $0x321] sm:$0xff] %vm79, %v7101
  %7166 = vst.msk [vmem:[#allocation2 + $0x1] sm:$0xff] %vm79, %v7040
  %7167 = vst.msk [vmem:[#allocation2 + $0x9] sm:$0xff] %vm79, %v7041
  %7168 = vst.msk [vmem:[#allocation2 + $0x1b1] sm:$0xff] %vm79, %v7072
  %7169 = vst.msk [vmem:[#allocation2 + $0x1b9] sm:$0xff] %vm79, %v7073
  %7170 = vst.msk [vmem:[%s148 + $0x1] sm:$0xff] %vm79, %v7066
  %7171 = vst.msk [vmem:[%s148 + $0x9] sm:$0xff] %vm79, %v7067
  %7172 = vst.msk [vmem:[%s148 + $0x1b1] sm:$0xff] %vm79, %v7098
  %7173 = vst.msk [vmem:[%s148 + $0x1b9] sm:$0xff] %vm79, %v7099
  %v7174 = vld [vmem:[#allocation2 + $0x2] sm:$0x1]
  %v7175 = vld [vmem:[#allocation2 + $0x1a] sm:$0x1]
  %v7176 = vld [vmem:[#allocation2 + $0x32] sm:$0x1]
  %v7177 = vld [vmem:[#allocation2 + $0x4a] sm:$0x1]
  %v7178 = vld [vmem:[#allocation2 + $0x62] sm:$0x1]
  %v7179 = vld [vmem:[#allocation2 + $0x7a] sm:$0x1]
  %v7180 = vld [vmem:[#allocation2 + $0x92] sm:$0x1]
  %v7181 = vld [vmem:[#allocation2 + $0xaa] sm:$0x1]
  %v7182 = vld [vmem:[#allocation2 + $0xc2] sm:$0x1]
  %v7183 = vld [vmem:[#allocation2 + $0xda] sm:$0x1]
  %v7184 = vld [vmem:[#allocation2 + $0xf2] sm:$0x1]
  %v7185 = vld [vmem:[#allocation2 + $0x10a] sm:$0x1]
  %v7186 = vld [vmem:[#allocation2 + $0x122] sm:$0x1]
  %v7187 = vld [vmem:[#allocation2 + $0x13a] sm:$0x1]
  %v7188 = vld [vmem:[#allocation2 + $0x152] sm:$0x1]
  %v7189 = vld [vmem:[#allocation2 + $0x16a] sm:$0x1]
  %v7190 = vld [vmem:[#allocation2 + $0x182] sm:$0x1]
  %v7191 = vld [vmem:[#allocation2 + $0x19a] sm:$0x1]
  %v7192 = vld [vmem:[#allocation2 + $0x1b2] sm:$0x1]
  %v7193 = vld [vmem:[#allocation2 + $0x1ca] sm:$0x1]
  %v7194 = vld [vmem:[#allocation2 + $0x1e2] sm:$0x1]
  %v7195 = vld [vmem:[#allocation2 + $0x1fa] sm:$0x1]
  %v7196 = vld [vmem:[#allocation2 + $0x212] sm:$0x1]
  %v7197 = vld [vmem:[#allocation2 + $0x22a] sm:$0x1]
  %v7198 = vld [vmem:[#allocation2 + $0x242] sm:$0x1]
  %v7199 = vld [vmem:[#allocation2 + $0x25a] sm:$0x1]
  %v7200 = vld [vmem:[#allocation2 + $0x272] sm:$0x1]
  %v7201 = vld [vmem:[#allocation2 + $0x28a] sm:$0x1]
  %v7202 = vld [vmem:[#allocation2 + $0x2a2] sm:$0x1]
  %v7203 = vld [vmem:[#allocation2 + $0x2ba] sm:$0x1]
  %v7204 = vld [vmem:[#allocation2 + $0x2d2] sm:$0x1]
  %v7205 = vld [vmem:[#allocation2 + $0x2ea] sm:$0x1]
  %v7206 = vld [vmem:[#allocation2 + $0x302] sm:$0x1]
  %v7207 = vld [vmem:[#allocation2 + $0x31a] sm:$0x1]
  %v7208 = vld [vmem:[#allocation2 + $0x332] sm:$0x1]
  %v7209 = vld [vmem:[#allocation2 + $0x34a] sm:$0x1]
  %7210 = vst.msk [vmem:[#allocation2] sm:$0x1] %vm189, %v7174
  %7211 = vst.msk [vmem:[#allocation2 + $0x18] sm:$0x1] %vm189, %v7175
  %7212 = vst.msk [vmem:[#allocation2 + $0x30] sm:$0x1] %vm189, %v7176
  %7213 = vst.msk [vmem:[#allocation2 + $0x48] sm:$0x1] %vm189, %v7177
  %7214 = vst.msk [vmem:[#allocation2 + $0x60] sm:$0x1] %vm189, %v7178
  %7215 = vst.msk [vmem:[#allocation2 + $0x78] sm:$0x1] %vm189, %v7179
  %7216 = vst.msk [vmem:[#allocation2 + $0x90] sm:$0x1] %vm189, %v7180
  %7217 = vst.msk [vmem:[#allocation2 + $0xa8] sm:$0x1] %vm189, %v7181
  %7218 = vst.msk [vmem:[#allocation2 + $0xc0] sm:$0x1] %vm189, %v7182
  %7219 = vst.msk [vmem:[#allocation2 + $0xd8] sm:$0x1] %vm189, %v7183
  %7220 = vst.msk [vmem:[#allocation2 + $0xf0] sm:$0x1] %vm189, %v7184
  %7221 = vst.msk [vmem:[#allocation2 + $0x108] sm:$0x1] %vm189, %v7185
  %7222 = vst.msk [vmem:[#allocation2 + $0x120] sm:$0x1] %vm189, %v7186
  %7223 = vst.msk [vmem:[#allocation2 + $0x138] sm:$0x1] %vm189, %v7187
  %7224 = vst.msk [vmem:[#allocation2 + $0x150] sm:$0x1] %vm189, %v7188
  %7225 = vst.msk [vmem:[#allocation2 + $0x168] sm:$0x1] %vm189, %v7189
  %7226 = vst.msk [vmem:[#allocation2 + $0x180] sm:$0x1] %vm189, %v7190
  %7227 = vst.msk [vmem:[#allocation2 + $0x198] sm:$0x1] %vm189, %v7191
  %7228 = vst.msk [vmem:[#allocation2 + $0x1b0] sm:$0x1] %vm189, %v7192
  %7229 = vst.msk [vmem:[#allocation2 + $0x1c8] sm:$0x1] %vm189, %v7193
  %7230 = vst.msk [vmem:[#allocation2 + $0x1e0] sm:$0x1] %vm189, %v7194
  %7231 = vst.msk [vmem:[#allocation2 + $0x1f8] sm:$0x1] %vm189, %v7195
  %7232 = vst.msk [vmem:[#allocation2 + $0x210] sm:$0x1] %vm189, %v7196
  %7233 = vst.msk [vmem:[#allocation2 + $0x228] sm:$0x1] %vm189, %v7197
  %7234 = vst.msk [vmem:[#allocation2 + $0x240] sm:$0x1] %vm189, %v7198
  %7235 = vst.msk [vmem:[#allocation2 + $0x258] sm:$0x1] %vm189, %v7199
  %7236 = vst.msk [vmem:[#allocation2 + $0x270] sm:$0x1] %vm189, %v7200
  %7237 = vst.msk [vmem:[#allocation2 + $0x288] sm:$0x1] %vm189, %v7201
  %7238 = vst.msk [vmem:[#allocation2 + $0x2a0] sm:$0x1] %vm189, %v7202
  %7239 = vst.msk [vmem:[#allocation2 + $0x2b8] sm:$0x1] %vm189, %v7203
  %7240 = vst.msk [vmem:[#allocation2 + $0x2d0] sm:$0x1] %vm189, %v7204
  %7241 = vst.msk [vmem:[#allocation2 + $0x2e8] sm:$0x1] %vm189, %v7205
  %7242 = vst.msk [vmem:[#allocation2 + $0x300] sm:$0x1] %vm189, %v7206
  %7243 = vst.msk [vmem:[#allocation2 + $0x318] sm:$0x1] %vm189, %v7207
  %7244 = vst.msk [vmem:[#allocation2 + $0x330] sm:$0x1] %vm189, %v7208
  %7245 = vst.msk [vmem:[#allocation2 + $0x348] sm:$0x1] %vm189, %v7209
  %v7246 = vld [vmem:[#allocation2 + $0xf] sm:$0x1]
  %v7247 = vld [vmem:[#allocation2 + $0x27] sm:$0x1]
  %v7248 = vld [vmem:[#allocation2 + $0x3f] sm:$0x1]
  %v7249 = vld [vmem:[#allocation2 + $0x57] sm:$0x1]
  %v7250 = vld [vmem:[#allocation2 + $0x6f] sm:$0x1]
  %v7251 = vld [vmem:[#allocation2 + $0x87] sm:$0x1]
  %v7252 = vld [vmem:[#allocation2 + $0x9f] sm:$0x1]
  %v7253 = vld [vmem:[#allocation2 + $0xb7] sm:$0x1]
  %v7254 = vld [vmem:[#allocation2 + $0xcf] sm:$0x1]
  %v7255 = vld [vmem:[#allocation2 + $0xe7] sm:$0x1]
  %v7256 = vld [vmem:[#allocation2 + $0xff] sm:$0x1]
  %v7257 = vld [vmem:[#allocation2 + $0x117] sm:$0x1]
  %v7258 = vld [vmem:[#allocation2 + $0x12f] sm:$0x1]
  %v7259 = vld [vmem:[#allocation2 + $0x147] sm:$0x1]
  %v7260 = vld [vmem:[#allocation2 + $0x15f] sm:$0x1]
  %v7261 = vld [vmem:[#allocation2 + $0x177] sm:$0x1]
  %v7262 = vld [vmem:[#allocation2 + $0x18f] sm:$0x1]
  %v7263 = vld [vmem:[#allocation2 + $0x1a7] sm:$0x1]
  %v7264 = vld [vmem:[#allocation2 + $0x1bf] sm:$0x1]
  %v7265 = vld [vmem:[#allocation2 + $0x1d7] sm:$0x1]
  %v7266 = vld [vmem:[#allocation2 + $0x1ef] sm:$0x1]
  %v7267 = vld [vmem:[#allocation2 + $0x207] sm:$0x1]
  %v7268 = vld [vmem:[#allocation2 + $0x21f] sm:$0x1]
  %v7269 = vld [vmem:[#allocation2 + $0x237] sm:$0x1]
  %v7270 = vld [vmem:[#allocation2 + $0x24f] sm:$0x1]
  %v7271 = vld [vmem:[#allocation2 + $0x267] sm:$0x1]
  %v7272 = vld [vmem:[#allocation2 + $0x27f] sm:$0x1]
  %v7273 = vld [vmem:[#allocation2 + $0x297] sm:$0x1]
  %v7274 = vld [vmem:[#allocation2 + $0x2af] sm:$0x1]
  %v7275 = vld [vmem:[#allocation2 + $0x2c7] sm:$0x1]
  %v7276 = vld [vmem:[#allocation2 + $0x2df] sm:$0x1]
  %v7277 = vld [vmem:[#allocation2 + $0x2f7] sm:$0x1]
  %v7278 = vld [vmem:[#allocation2 + $0x30f] sm:$0x1]
  %v7279 = vld [vmem:[#allocation2 + $0x327] sm:$0x1]
  %v7280 = vld [vmem:[#allocation2 + $0x33f] sm:$0x1]
  %v7281 = vld [vmem:[#allocation2 + $0x357] sm:$0x1]
  %7282 = vst.msk [vmem:[#allocation2 + $0x11] sm:$0x1] %vm189, %v7246
  %7283 = vst.msk [vmem:[#allocation2 + $0x29] sm:$0x1] %vm189, %v7247
  %7284 = vst.msk [vmem:[#allocation2 + $0x41] sm:$0x1] %vm189, %v7248
  %7285 = vst.msk [vmem:[#allocation2 + $0x59] sm:$0x1] %vm189, %v7249
  %7286 = vst.msk [vmem:[#allocation2 + $0x71] sm:$0x1] %vm189, %v7250
  %7287 = vst.msk [vmem:[#allocation2 + $0x89] sm:$0x1] %vm189, %v7251
  %7288 = vst.msk [vmem:[#allocation2 + $0xa1] sm:$0x1] %vm189, %v7252
  %7289 = vst.msk [vmem:[#allocation2 + $0xb9] sm:$0x1] %vm189, %v7253
  %7290 = vst.msk [vmem:[#allocation2 + $0xd1] sm:$0x1] %vm189, %v7254
  %7291 = vst.msk [vmem:[#allocation2 + $0xe9] sm:$0x1] %vm189, %v7255
  %7292 = vst.msk [vmem:[#allocation2 + $0x101] sm:$0x1] %vm189, %v7256
  %7293 = vst.msk [vmem:[#allocation2 + $0x119] sm:$0x1] %vm189, %v7257
  %7294 = vst.msk [vmem:[#allocation2 + $0x131] sm:$0x1] %vm189, %v7258
  %7295 = vst.msk [vmem:[#allocation2 + $0x149] sm:$0x1] %vm189, %v7259
  %7296 = vst.msk [vmem:[#allocation2 + $0x161] sm:$0x1] %vm189, %v7260
  %7297 = vst.msk [vmem:[#allocation2 + $0x179] sm:$0x1] %vm189, %v7261
  %7298 = vst.msk [vmem:[#allocation2 + $0x191] sm:$0x1] %vm189, %v7262
  %7299 = vst.msk [vmem:[#allocation2 + $0x1a9] sm:$0x1] %vm189, %v7263
  %7300 = vst.msk [vmem:[#allocation2 + $0x1c1] sm:$0x1] %vm189, %v7264
  %7301 = vst.msk [vmem:[#allocation2 + $0x1d9] sm:$0x1] %vm189, %v7265
  %7302 = vst.msk [vmem:[#allocation2 + $0x1f1] sm:$0x1] %vm189, %v7266
  %7303 = vst.msk [vmem:[#allocation2 + $0x209] sm:$0x1] %vm189, %v7267
  %7304 = vst.msk [vmem:[#allocation2 + $0x221] sm:$0x1] %vm189, %v7268
  %7305 = vst.msk [vmem:[#allocation2 + $0x239] sm:$0x1] %vm189, %v7269
  %7306 = vst.msk [vmem:[#allocation2 + $0x251] sm:$0x1] %vm189, %v7270
  %7307 = vst.msk [vmem:[#allocation2 + $0x269] sm:$0x1] %vm189, %v7271
  %7308 = vst.msk [vmem:[#allocation2 + $0x281] sm:$0x1] %vm189, %v7272
  %7309 = vst.msk [vmem:[#allocation2 + $0x299] sm:$0x1] %vm189, %v7273
  %7310 = vst.msk [vmem:[#allocation2 + $0x2b1] sm:$0x1] %vm189, %v7274
  %7311 = vst.msk [vmem:[#allocation2 + $0x2c9] sm:$0x1] %vm189, %v7275
  %7312 = vst.msk [vmem:[#allocation2 + $0x2e1] sm:$0x1] %vm189, %v7276
  %7313 = vst.msk [vmem:[#allocation2 + $0x2f9] sm:$0x1] %vm189, %v7277
  %7314 = vst.msk [vmem:[#allocation2 + $0x311] sm:$0x1] %vm189, %v7278
  %7315 = vst.msk [vmem:[#allocation2 + $0x329] sm:$0x1] %vm189, %v7279
  %7316 = vst.msk [vmem:[#allocation2 + $0x341] sm:$0x1] %vm189, %v7280
  %7317 = vst.msk [vmem:[#allocation2 + $0x359] sm:$0x1] %vm189, %v7281
  %v7318 = vld [vmem:[#allocation2] sm:$0xff]
  %v7319 = vld [vmem:[#allocation2 + $0x8] sm:$0xff]
  %v7320 = vld [vmem:[#allocation2 + $0x18] sm:$0xff]
  %v7321 = vld [vmem:[#allocation2 + $0x20] sm:$0xff]
  %v7322 = vld [vmem:[#allocation2 + $0x30] sm:$0xff]
  %v7323 = vld [vmem:[#allocation2 + $0x38] sm:$0xff]
  %v7324 = vld [vmem:[#allocation2 + $0x48] sm:$0xff]
  %v7325 = vld [vmem:[#allocation2 + $0x50] sm:$0xff]
  %v7326 = vld [vmem:[#allocation2 + $0x60] sm:$0xff]
  %v7327 = vld [vmem:[#allocation2 + $0x68] sm:$0xff]
  %v7328 = vld [vmem:[#allocation2 + $0x78] sm:$0xff]
  %v7329 = vld [vmem:[#allocation2 + $0x80] sm:$0xff]
  %v7330 = vld [vmem:[#allocation2 + $0x90] sm:$0xff]
  %v7331 = vld [vmem:[#allocation2 + $0x98] sm:$0xff]
  %v7332 = vld [vmem:[#allocation2 + $0xa8] sm:$0xff]
  %v7333 = vld [vmem:[#allocation2 + $0xb0] sm:$0xff]
  %v7334 = vld [vmem:[#allocation2 + $0xc0] sm:$0xff]
  %v7335 = vld [vmem:[#allocation2 + $0xc8] sm:$0xff]
  %v7336 = vld [vmem:[#allocation2 + $0xd8] sm:$0xff]
  %v7337 = vld [vmem:[#allocation2 + $0xe0] sm:$0xff]
  %v7338 = vld [vmem:[#allocation2 + $0xf0] sm:$0xff]
  %v7339 = vld [vmem:[#allocation2 + $0xf8] sm:$0xff]
  %v7340 = vld [vmem:[#allocation2 + $0x108] sm:$0xff]
  %v7341 = vld [vmem:[#allocation2 + $0x110] sm:$0xff]
  %v7342 = vld [vmem:[#allocation2 + $0x120] sm:$0xff]
  %v7343 = vld [vmem:[#allocation2 + $0x128] sm:$0xff]
  %v7344 = vld [vmem:[#allocation2 + $0x138] sm:$0xff]
  %v7345 = vld [vmem:[#allocation2 + $0x140] sm:$0xff]
  %v7346 = vld [vmem:[#allocation2 + $0x150] sm:$0xff]
  %v7347 = vld [vmem:[#allocation2 + $0x158] sm:$0xff]
  %v7348 = vld [vmem:[#allocation2 + $0x168] sm:$0xff]
  %v7349 = vld [vmem:[#allocation2 + $0x170] sm:$0xff]
  %v7350 = vld [vmem:[#allocation2 + $0x1b0] sm:$0xff]
  %v7351 = vld [vmem:[#allocation2 + $0x1b8] sm:$0xff]
  %v7352 = vld [vmem:[#allocation2 + $0x1c8] sm:$0xff]
  %v7353 = vld [vmem:[#allocation2 + $0x1d0] sm:$0xff]
  %v7354 = vld [vmem:[#allocation2 + $0x1e0] sm:$0xff]
  %v7355 = vld [vmem:[#allocation2 + $0x1e8] sm:$0xff]
  %v7356 = vld [vmem:[#allocation2 + $0x1f8] sm:$0xff]
  %v7357 = vld [vmem:[#allocation2 + $0x200] sm:$0xff]
  %v7358 = vld [vmem:[#allocation2 + $0x210] sm:$0xff]
  %v7359 = vld [vmem:[#allocation2 + $0x218] sm:$0xff]
  %v7360 = vld [vmem:[#allocation2 + $0x228] sm:$0xff]
  %v7361 = vld [vmem:[#allocation2 + $0x230] sm:$0xff]
  %v7362 = vld [vmem:[#allocation2 + $0x240] sm:$0xff]
  %v7363 = vld [vmem:[#allocation2 + $0x248] sm:$0xff]
  %v7364 = vld [vmem:[#allocation2 + $0x258] sm:$0xff]
  %v7365 = vld [vmem:[#allocation2 + $0x260] sm:$0xff]
  %v7366 = vld [vmem:[#allocation2 + $0x270] sm:$0xff]
  %v7367 = vld [vmem:[#allocation2 + $0x278] sm:$0xff]
  %v7368 = vld [vmem:[#allocation2 + $0x288] sm:$0xff]
  %v7369 = vld [vmem:[#allocation2 + $0x290] sm:$0xff]
  %v7370 = vld [vmem:[#allocation2 + $0x2a0] sm:$0xff]
  %v7371 = vld [vmem:[#allocation2 + $0x2a8] sm:$0xff]
  %v7372 = vld [vmem:[#allocation2 + $0x2b8] sm:$0xff]
  %v7373 = vld [vmem:[#allocation2 + $0x2c0] sm:$0xff]
  %v7374 = vld [vmem:[#allocation2 + $0x2d0] sm:$0xff]
  %v7375 = vld [vmem:[#allocation2 + $0x2d8] sm:$0xff]
  %v7376 = vld [vmem:[#allocation2 + $0x2e8] sm:$0xff]
  %v7377 = vld [vmem:[#allocation2 + $0x2f0] sm:$0xff]
  %v7378 = vld [vmem:[#allocation2 + $0x300] sm:$0xff]
  %v7379 = vld [vmem:[#allocation2 + $0x308] sm:$0xff]
  %v7380 = vld [vmem:[#allocation2 + $0x318] sm:$0xff]
  %v7381 = vld [vmem:[#allocation2 + $0x320] sm:$0xff]
  %v7382 = vld [vmem:[%s2] sm:$0xf]
  %v7383 = vld [vmem:[#allocation2 + $0x1] sm:$0xff]
  %v7384 = vld [vmem:[#allocation2 + $0x9] sm:$0xff]
  %v7385 = vld [vmem:[#allocation2 + $0x19] sm:$0xff]
  %v7386 = vld [vmem:[#allocation2 + $0x21] sm:$0xff]
  %v7387 = vld [vmem:[#allocation2 + $0x31] sm:$0xff]
  %v7388 = vld [vmem:[#allocation2 + $0x39] sm:$0xff]
  %v7389 = vld [vmem:[#allocation2 + $0x49] sm:$0xff]
  %v7390 = vld [vmem:[#allocation2 + $0x51] sm:$0xff]
  %v7391 = vld [vmem:[#allocation2 + $0x61] sm:$0xff]
  %v7392 = vld [vmem:[#allocation2 + $0x69] sm:$0xff]
  %v7393 = vld [vmem:[#allocation2 + $0x79] sm:$0xff]
  %v7394 = vld [vmem:[#allocation2 + $0x81] sm:$0xff]
  %v7395 = vld [vmem:[#allocation2 + $0x91] sm:$0xff]
  %v7396 = vld [vmem:[#allocation2 + $0x99] sm:$0xff]
  %v7397 = vld [vmem:[#allocation2 + $0xa9] sm:$0xff]
  %v7398 = vld [vmem:[#allocation2 + $0xb1] sm:$0xff]
  %v7399 = vld [vmem:[#allocation2 + $0xc1] sm:$0xff]
  %v7400 = vld [vmem:[#allocation2 + $0xc9] sm:$0xff]
  %v7401 = vld [vmem:[#allocation2 + $0xd9] sm:$0xff]
  %v7402 = vld [vmem:[#allocation2 + $0xe1] sm:$0xff]
  %v7403 = vld [vmem:[#allocation2 + $0xf1] sm:$0xff]
  %v7404 = vld [vmem:[#allocation2 + $0xf9] sm:$0xff]
  %v7405 = vld [vmem:[#allocation2 + $0x109] sm:$0xff]
  %v7406 = vld [vmem:[#allocation2 + $0x111] sm:$0xff]
  %v7407 = vld [vmem:[#allocation2 + $0x121] sm:$0xff]
  %v7408 = vld [vmem:[#allocation2 + $0x129] sm:$0xff]
  %v7409 = vld [vmem:[#allocation2 + $0x139] sm:$0xff]
  %v7410 = vld [vmem:[#allocation2 + $0x141] sm:$0xff]
  %v7411 = vld [vmem:[#allocation2 + $0x151] sm:$0xff]
  %v7412 = vld [vmem:[#allocation2 + $0x159] sm:$0xff]
  %v7413 = vld [vmem:[#allocation2 + $0x169] sm:$0xff]
  %v7414 = vld [vmem:[#allocation2 + $0x171] sm:$0xff]
  %v7415 = vld [vmem:[#allocation2 + $0x1b1] sm:$0xff]
  %v7416 = vld [vmem:[#allocation2 + $0x1b9] sm:$0xff]
  %v7417 = vld [vmem:[#allocation2 + $0x1c9] sm:$0xff]
  %v7418 = vld [vmem:[#allocation2 + $0x1d1] sm:$0xff]
  %v7419 = vld [vmem:[#allocation2 + $0x1e1] sm:$0xff]
  %v7420 = vld [vmem:[#allocation2 + $0x1e9] sm:$0xff]
  %v7421 = vld [vmem:[#allocation2 + $0x1f9] sm:$0xff]
  %v7422 = vld [vmem:[#allocation2 + $0x201] sm:$0xff]
  %v7423 = vld [vmem:[#allocation2 + $0x211] sm:$0xff]
  %v7424 = vld [vmem:[#allocation2 + $0x219] sm:$0xff]
  %v7425 = vld [vmem:[#allocation2 + $0x229] sm:$0xff]
  %v7426 = vld [vmem:[#allocation2 + $0x231] sm:$0xff]
  %v7427 = vld [vmem:[#allocation2 + $0x241] sm:$0xff]
  %v7428 = vld [vmem:[#allocation2 + $0x249] sm:$0xff]
  %v7429 = vld [vmem:[#allocation2 + $0x259] sm:$0xff]
  %v7430 = vld [vmem:[#allocation2 + $0x261] sm:$0xff]
  %v7431 = vld [vmem:[#allocation2 + $0x271] sm:$0xff]
  %v7432 = vld [vmem:[#allocation2 + $0x279] sm:$0xff]
  %v7433 = vld [vmem:[#allocation2 + $0x289] sm:$0xff]
  %v7434 = vld [vmem:[#allocation2 + $0x291] sm:$0xff]
  %v7435 = vld [vmem:[#allocation2 + $0x2a1] sm:$0xff]
  %v7436 = vld [vmem:[#allocation2 + $0x2a9] sm:$0xff]
  %v7437 = vld [vmem:[#allocation2 + $0x2b9] sm:$0xff]
  %v7438 = vld [vmem:[#allocation2 + $0x2c1] sm:$0xff]
  %v7439 = vld [vmem:[#allocation2 + $0x2d1] sm:$0xff]
  %v7440 = vld [vmem:[#allocation2 + $0x2d9] sm:$0xff]
  %v7441 = vld [vmem:[#allocation2 + $0x2e9] sm:$0xff]
  %v7442 = vld [vmem:[#allocation2 + $0x2f1] sm:$0xff]
  %v7443 = vld [vmem:[#allocation2 + $0x301] sm:$0xff]
  %v7444 = vld [vmem:[#allocation2 + $0x309] sm:$0xff]
  %v7445 = vld [vmem:[#allocation2 + $0x319] sm:$0xff]
  %v7446 = vld [vmem:[#allocation2 + $0x321] sm:$0xff]
  %s7447 = scalar_lea.vmem %s2, 4
  %v7448 = vld [vmem:[%s7447] sm:$0xf]
  %v7450 = vsel %vm79, %v7383, 0
  %v7453 = vsel %vm79, %v7384, 0
  %v7456 = vsel %vm79, %v7385, 0
  %v7459 = vsel %vm79, %v7386, 0
  %v7462 = vsel %vm79, %v7387, 0
  %v7465 = vsel %vm79, %v7388, 0
  %v7468 = vsel %vm79, %v7389, 0
  %v7471 = vsel %vm79, %v7390, 0
  %v7474 = vsel %vm79, %v7391, 0
  %v7477 = vsel %vm79, %v7392, 0
  %v7480 = vsel %vm79, %v7393, 0
  %v7483 = vsel %vm79, %v7394, 0
  %v7486 = vsel %vm79, %v7395, 0
  %v7489 = vsel %vm79, %v7396, 0
  %v7492 = vsel %vm79, %v7397, 0
  %v7495 = vsel %vm79, %v7398, 0
  %v7498 = vsel %vm79, %v7399, 0
  %v7501 = vsel %vm79, %v7400, 0
  %v7504 = vsel %vm79, %v7401, 0
  %v7507 = vsel %vm79, %v7402, 0
  %v7510 = vsel %vm79, %v7403, 0
  %v7513 = vsel %vm79, %v7404, 0
  %v7516 = vsel %vm79, %v7405, 0
  %v7519 = vsel %vm79, %v7406, 0
  %v7522 = vsel %vm79, %v7407, 0
  %v7525 = vsel %vm79, %v7408, 0
  %v7528 = vsel %vm79, %v7409, 0
  %v7531 = vsel %vm79, %v7410, 0
  %v7534 = vsel %vm79, %v7411, 0
  %v7537 = vsel %vm79, %v7412, 0
  %v7540 = vsel %vm79, %v7413, 0
  %v7543 = vsel %vm79, %v7414, 0
  %v7546 = vsel %vm79, %v7415, 0
  %v7549 = vsel %vm79, %v7416, 0
  %v7552 = vsel %vm79, %v7417, 0
  %v7555 = vsel %vm79, %v7418, 0
  %v7558 = vsel %vm79, %v7419, 0
  %v7561 = vsel %vm79, %v7420, 0
  %v7564 = vsel %vm79, %v7421, 0
  %v7567 = vsel %vm79, %v7422, 0
  %v7570 = vsel %vm79, %v7423, 0
  %v7573 = vsel %vm79, %v7424, 0
  %v7576 = vsel %vm79, %v7425, 0
  %v7579 = vsel %vm79, %v7426, 0
  %v7582 = vsel %vm79, %v7427, 0
  %v7585 = vsel %vm79, %v7428, 0
  %v7588 = vsel %vm79, %v7429, 0
  %v7591 = vsel %vm79, %v7430, 0
  %v7594 = vsel %vm79, %v7431, 0
  %v7597 = vsel %vm79, %v7432, 0
  %v7600 = vsel %vm79, %v7433, 0
  %v7603 = vsel %vm79, %v7434, 0
  %v7606 = vsel %vm79, %v7435, 0
  %v7609 = vsel %vm79, %v7436, 0
  %v7612 = vsel %vm79, %v7437, 0
  %v7615 = vsel %vm79, %v7438, 0
  %v7618 = vsel %vm79, %v7439, 0
  %v7621 = vsel %vm79, %v7440, 0
  %v7624 = vsel %vm79, %v7441, 0
  %v7627 = vsel %vm79, %v7442, 0
  %v7630 = vsel %vm79, %v7443, 0
  %v7633 = vsel %vm79, %v7444, 0
  %v7636 = vsel %vm79, %v7445, 0
  %v7639 = vsel %vm79, %v7446, 0
  %v7642 = vsel %vm621, %v7448, 0
  %7644 = vmatprep.subr.mxu0 0.0
  %7645 = vmatpush1.msra.mxu0 0.0
  %7646 = vmatprep.subr.mxu0 0.0
  %7647 = vmatpush1.msra.mxu0 0.0
  %7648 = vmatprep.subr.mxu0 0.0
  %7649 = vmatpush1.msra.mxu0 0.0
  %7650 = vmatprep.subr.mxu0 0.0
  %7651 = vmatpush1.msra.mxu0 0.0
  %7652 = vmatprep.subr.mxu0 0.0
  %7653 = vmatpush1.msra.mxu0 0.0
  %7654 = vmatprep.subr.mxu0 0.0
  %7655 = vmatpush1.msra.mxu0 0.0
  %7656 = vmatprep.subr.mxu0 0.0
  %7657 = vmatpush1.msra.mxu0 0.0
  %7658 = vmatprep.subr.mxu0 0.0
  %7659 = vmatpush1.msra.mxu0 0.0
  %7660 = vmatprep.subr.mxu0 0.0
  %7661 = vmatpush1.msra.mxu0 0.0
  %7662 = vmatprep.subr.mxu0 0.0
  %7663 = vmatpush1.msra.mxu0 0.0
  %7664 = vmatprep.subr.mxu0 0.0
  %7665 = vmatpush1.msra.mxu0 0.0
  %7666 = vmatprep.subr.mxu0 0.0
  %7667 = vmatpush1.msra.mxu0 0.0
  %7668 = vmatprep.subr.mxu0 0.0
  %7669 = vmatpush1.msra.mxu0 0.0
  %7670 = vmatprep.subr.mxu0 0.0
  %7671 = vmatpush1.msra.mxu0 0.0
  %7672 = vmatprep.subr.mxu0 0.0
  %7673 = vmatpush1.msra.mxu0 0.0
  %7674 = vmatprep.subr.mxu0 0.0
  %7675 = vmatpush1.msra.mxu0 %v7642
  %7676 = vmatprep.subr.mxu0 0.0
  %7677 = vmatpush2.msra.mxu0 0.0
  %7678 = vmatprep.subr.mxu0 0.0
  %7679 = vmatpush2.msra.mxu0 0.0
  %7680 = vmatprep.subr.mxu0 0.0
  %7681 = vmatpush2.msra.mxu0 0.0
  %7682 = vmatprep.subr.mxu0 0.0
  %7683 = vmatpush2.msra.mxu0 0.0
  %7684 = vmatprep.subr.mxu0 0.0
  %7685 = vmatpush2.msra.mxu0 0.0
  %7686 = vmatprep.subr.mxu0 0.0
  %7687 = vmatpush2.msra.mxu0 0.0
  %7688 = vmatprep.subr.mxu0 0.0
  %7689 = vmatpush2.msra.mxu0 0.0
  %7690 = vmatprep.subr.mxu0 0.0
  %7691 = vmatpush2.msra.mxu0 0.0
  %7692 = vmatprep.subr.mxu0 0.0
  %7693 = vmatpush2.msra.mxu0 0.0
  %7694 = vmatprep.subr.mxu0 0.0
  %7695 = vmatpush2.msra.mxu0 0.0
  %7696 = vmatprep.subr.mxu0 0.0
  %7697 = vmatpush2.msra.mxu0 0.0
  %7698 = vmatprep.subr.mxu0 0.0
  %7699 = vmatpush2.msra.mxu0 0.0
  %7700 = vmatprep.subr.mxu0 0.0
  %7701 = vmatpush2.msra.mxu0 0.0
  %7702 = vmatprep.subr.mxu0 0.0
  %7703 = vmatpush2.msra.mxu0 0.0
  %7704 = vmatprep.subr.mxu0 0.0
  %7705 = vmatpush2.msra.mxu0 0.0
  %7706 = vmatprep.subr.mxu0 0.0
  %7707 = vmatpush2.msra.mxu0 0.0
  %7708 = vmatprep.mubr.f32.mxu0 0.0
  %7709 = vmatmul.mubr.f32.gmra.mxu0 %v7450
  %v7710 = vpop.f32.mrf.mxu0
  %v7711 = vadd.f32 0.0, %v7710
  %v7712 = vpop.f32.mrf.mxu0
  %7713 = vmatprep.mubr.f32.mxu0 0.0
  %7714 = vmatmul.mubr.f32.gmra.mxu0 %v7453
  %v7715 = vpop.f32.mrf.mxu0
  %v7716 = vadd.f32 0.0, %v7715
  %v7717 = vpop.f32.mrf.mxu0
  %7718 = vmatprep.mubr.f32.mxu0 0.0
  %7719 = vmatmul.mubr.f32.gmra.mxu0 %v7456
  %v7720 = vpop.f32.mrf.mxu0
  %v7721 = vadd.f32 0.0, %v7720
  %v7722 = vpop.f32.mrf.mxu0
  %7723 = vmatprep.mubr.f32.mxu0 0.0
  %7724 = vmatmul.mubr.f32.gmra.mxu0 %v7459
  %v7725 = vpop.f32.mrf.mxu0
  %v7726 = vadd.f32 0.0, %v7725
  %v7727 = vpop.f32.mrf.mxu0
  %7728 = vmatprep.mubr.f32.mxu0 0.0
  %7729 = vmatmul.mubr.f32.gmra.mxu0 %v7462
  %v7730 = vpop.f32.mrf.mxu0
  %v7731 = vadd.f32 0.0, %v7730
  %v7732 = vpop.f32.mrf.mxu0
  %7733 = vmatprep.mubr.f32.mxu0 0.0
  %7734 = vmatmul.mubr.f32.gmra.mxu0 %v7465
  %v7735 = vpop.f32.mrf.mxu0
  %v7736 = vadd.f32 0.0, %v7735
  %v7737 = vpop.f32.mrf.mxu0
  %7738 = vmatprep.mubr.f32.mxu0 0.0
  %7739 = vmatmul.mubr.f32.gmra.mxu0 %v7468
  %v7740 = vpop.f32.mrf.mxu0
  %v7741 = vadd.f32 0.0, %v7740
  %v7742 = vpop.f32.mrf.mxu0
  %7743 = vmatprep.mubr.f32.mxu0 0.0
  %7744 = vmatmul.mubr.f32.gmra.mxu0 %v7471
  %v7745 = vpop.f32.mrf.mxu0
  %v7746 = vadd.f32 0.0, %v7745
  %v7747 = vpop.f32.mrf.mxu0
  %7748 = vmatprep.mubr.f32.mxu0 0.0
  %7749 = vmatmul.mubr.f32.gmra.mxu0 %v7474
  %v7750 = vpop.f32.mrf.mxu0
  %v7751 = vadd.f32 0.0, %v7750
  %v7752 = vpop.f32.mrf.mxu0
  %7753 = vmatprep.mubr.f32.mxu0 0.0
  %7754 = vmatmul.mubr.f32.gmra.mxu0 %v7477
  %v7755 = vpop.f32.mrf.mxu0
  %v7756 = vadd.f32 0.0, %v7755
  %v7757 = vpop.f32.mrf.mxu0
  %7758 = vmatprep.mubr.f32.mxu0 0.0
  %7759 = vmatmul.mubr.f32.gmra.mxu0 %v7480
  %v7760 = vpop.f32.mrf.mxu0
  %v7761 = vadd.f32 0.0, %v7760
  %v7762 = vpop.f32.mrf.mxu0
  %7763 = vmatprep.mubr.f32.mxu0 0.0
  %7764 = vmatmul.mubr.f32.gmra.mxu0 %v7483
  %v7765 = vpop.f32.mrf.mxu0
  %v7766 = vadd.f32 0.0, %v7765
  %v7767 = vpop.f32.mrf.mxu0
  %7768 = vmatprep.mubr.f32.mxu0 0.0
  %7769 = vmatmul.mubr.f32.gmra.mxu0 %v7486
  %v7770 = vpop.f32.mrf.mxu0
  %v7771 = vadd.f32 0.0, %v7770
  %v7772 = vpop.f32.mrf.mxu0
  %7773 = vmatprep.mubr.f32.mxu0 0.0
  %7774 = vmatmul.mubr.f32.gmra.mxu0 %v7489
  %v7775 = vpop.f32.mrf.mxu0
  %v7776 = vadd.f32 0.0, %v7775
  %v7777 = vpop.f32.mrf.mxu0
  %7778 = vmatprep.mubr.f32.mxu0 0.0
  %7779 = vmatmul.mubr.f32.gmra.mxu0 %v7492
  %v7780 = vpop.f32.mrf.mxu0
  %v7781 = vadd.f32 0.0, %v7780
  %v7782 = vpop.f32.mrf.mxu0
  %7783 = vmatprep.mubr.f32.mxu0 0.0
  %7784 = vmatmul.mubr.f32.gmra.mxu0 %v7495
  %v7785 = vpop.f32.mrf.mxu0
  %v7786 = vadd.f32 0.0, %v7785
  %v7787 = vpop.f32.mrf.mxu0
  %7788 = vmatprep.mubr.f32.mxu0 0.0
  %7789 = vmatmul.mubr.f32.gmra.mxu0 %v7498
  %v7790 = vpop.f32.mrf.mxu0
  %v7791 = vadd.f32 0.0, %v7790
  %v7792 = vpop.f32.mrf.mxu0
  %7793 = vmatprep.mubr.f32.mxu0 0.0
  %7794 = vmatmul.mubr.f32.gmra.mxu0 %v7501
  %v7795 = vpop.f32.mrf.mxu0
  %v7796 = vadd.f32 0.0, %v7795
  %v7797 = vpop.f32.mrf.mxu0
  %7798 = vmatprep.mubr.f32.mxu0 0.0
  %7799 = vmatmul.mubr.f32.gmra.mxu0 %v7504
  %v7800 = vpop.f32.mrf.mxu0
  %v7801 = vadd.f32 0.0, %v7800
  %v7802 = vpop.f32.mrf.mxu0
  %7803 = vmatprep.mubr.f32.mxu0 0.0
  %7804 = vmatmul.mubr.f32.gmra.mxu0 %v7507
  %v7805 = vpop.f32.mrf.mxu0
  %v7806 = vadd.f32 0.0, %v7805
  %v7807 = vpop.f32.mrf.mxu0
  %7808 = vmatprep.mubr.f32.mxu0 0.0
  %7809 = vmatmul.mubr.f32.gmra.mxu0 %v7510
  %v7810 = vpop.f32.mrf.mxu0
  %v7811 = vadd.f32 0.0, %v7810
  %v7812 = vpop.f32.mrf.mxu0
  %7813 = vmatprep.mubr.f32.mxu0 0.0
  %7814 = vmatmul.mubr.f32.gmra.mxu0 %v7513
  %v7815 = vpop.f32.mrf.mxu0
  %v7816 = vadd.f32 0.0, %v7815
  %v7817 = vpop.f32.mrf.mxu0
  %7818 = vmatprep.mubr.f32.mxu0 0.0
  %7819 = vmatmul.mubr.f32.gmra.mxu0 %v7516
  %v7820 = vpop.f32.mrf.mxu0
  %v7821 = vadd.f32 0.0, %v7820
  %v7822 = vpop.f32.mrf.mxu0
  %7823 = vmatprep.mubr.f32.mxu0 0.0
  %7824 = vmatmul.mubr.f32.gmra.mxu0 %v7519
  %v7825 = vpop.f32.mrf.mxu0
  %v7826 = vadd.f32 0.0, %v7825
  %v7827 = vpop.f32.mrf.mxu0
  %7828 = vmatprep.mubr.f32.mxu0 0.0
  %7829 = vmatmul.mubr.f32.gmra.mxu0 %v7522
  %v7830 = vpop.f32.mrf.mxu0
  %v7831 = vadd.f32 0.0, %v7830
  %v7832 = vpop.f32.mrf.mxu0
  %7833 = vmatprep.mubr.f32.mxu0 0.0
  %7834 = vmatmul.mubr.f32.gmra.mxu0 %v7525
  %v7835 = vpop.f32.mrf.mxu0
  %v7836 = vadd.f32 0.0, %v7835
  %v7837 = vpop.f32.mrf.mxu0
  %7838 = vmatprep.mubr.f32.mxu0 0.0
  %7839 = vmatmul.mubr.f32.gmra.mxu0 %v7528
  %v7840 = vpop.f32.mrf.mxu0
  %v7841 = vadd.f32 0.0, %v7840
  %v7842 = vpop.f32.mrf.mxu0
  %7843 = vmatprep.mubr.f32.mxu0 0.0
  %7844 = vmatmul.mubr.f32.gmra.mxu0 %v7531
  %v7845 = vpop.f32.mrf.mxu0
  %v7846 = vadd.f32 0.0, %v7845
  %v7847 = vpop.f32.mrf.mxu0
  %7848 = vmatprep.mubr.f32.mxu0 0.0
  %7849 = vmatmul.mubr.f32.gmra.mxu0 %v7534
  %v7850 = vpop.f32.mrf.mxu0
  %v7851 = vadd.f32 0.0, %v7850
  %v7852 = vpop.f32.mrf.mxu0
  %7853 = vmatprep.mubr.f32.mxu0 0.0
  %7854 = vmatmul.mubr.f32.gmra.mxu0 %v7537
  %v7855 = vpop.f32.mrf.mxu0
  %v7856 = vadd.f32 0.0, %v7855
  %v7857 = vpop.f32.mrf.mxu0
  %7858 = vmatprep.mubr.f32.mxu0 0.0
  %7859 = vmatmul.mubr.f32.gmra.mxu0 %v7540
  %v7860 = vpop.f32.mrf.mxu0
  %v7861 = vadd.f32 0.0, %v7860
  %v7862 = vpop.f32.mrf.mxu0
  %7863 = vmatprep.mubr.f32.mxu0 0.0
  %7864 = vmatmul.mubr.f32.gmra.mxu0 %v7543
  %v7865 = vpop.f32.mrf.mxu0
  %v7866 = vadd.f32 0.0, %v7865
  %v7867 = vpop.f32.mrf.mxu0
  %7868 = vmatprep.mubr.f32.mxu0 0.0
  %7869 = vmatmul.mubr.f32.gmra.mxu0 %v7546
  %v7870 = vpop.f32.mrf.mxu0
  %v7871 = vadd.f32 0.0, %v7870
  %v7872 = vpop.f32.mrf.mxu0
  %7873 = vmatprep.mubr.f32.mxu0 0.0
  %7874 = vmatmul.mubr.f32.gmra.mxu0 %v7549
  %v7875 = vpop.f32.mrf.mxu0
  %v7876 = vadd.f32 0.0, %v7875
  %v7877 = vpop.f32.mrf.mxu0
  %7878 = vmatprep.mubr.f32.mxu0 0.0
  %7879 = vmatmul.mubr.f32.gmra.mxu0 %v7552
  %v7880 = vpop.f32.mrf.mxu0
  %v7881 = vadd.f32 0.0, %v7880
  %v7882 = vpop.f32.mrf.mxu0
  %7883 = vmatprep.mubr.f32.mxu0 0.0
  %7884 = vmatmul.mubr.f32.gmra.mxu0 %v7555
  %v7885 = vpop.f32.mrf.mxu0
  %v7886 = vadd.f32 0.0, %v7885
  %v7887 = vpop.f32.mrf.mxu0
  %7888 = vmatprep.mubr.f32.mxu0 0.0
  %7889 = vmatmul.mubr.f32.gmra.mxu0 %v7558
  %v7890 = vpop.f32.mrf.mxu0
  %v7891 = vadd.f32 0.0, %v7890
  %v7892 = vpop.f32.mrf.mxu0
  %7893 = vmatprep.mubr.f32.mxu0 0.0
  %7894 = vmatmul.mubr.f32.gmra.mxu0 %v7561
  %v7895 = vpop.f32.mrf.mxu0
  %v7896 = vadd.f32 0.0, %v7895
  %v7897 = vpop.f32.mrf.mxu0
  %7898 = vmatprep.mubr.f32.mxu0 0.0
  %7899 = vmatmul.mubr.f32.gmra.mxu0 %v7564
  %v7900 = vpop.f32.mrf.mxu0
  %v7901 = vadd.f32 0.0, %v7900
  %v7902 = vpop.f32.mrf.mxu0
  %7903 = vmatprep.mubr.f32.mxu0 0.0
  %7904 = vmatmul.mubr.f32.gmra.mxu0 %v7567
  %v7905 = vpop.f32.mrf.mxu0
  %v7906 = vadd.f32 0.0, %v7905
  %v7907 = vpop.f32.mrf.mxu0
  %7908 = vmatprep.mubr.f32.mxu0 0.0
  %7909 = vmatmul.mubr.f32.gmra.mxu0 %v7570
  %v7910 = vpop.f32.mrf.mxu0
  %v7911 = vadd.f32 0.0, %v7910
  %v7912 = vpop.f32.mrf.mxu0
  %7913 = vmatprep.mubr.f32.mxu0 0.0
  %7914 = vmatmul.mubr.f32.gmra.mxu0 %v7573
  %v7915 = vpop.f32.mrf.mxu0
  %v7916 = vadd.f32 0.0, %v7915
  %v7917 = vpop.f32.mrf.mxu0
  %7918 = vmatprep.mubr.f32.mxu0 0.0
  %7919 = vmatmul.mubr.f32.gmra.mxu0 %v7576
  %v7920 = vpop.f32.mrf.mxu0
  %v7921 = vadd.f32 0.0, %v7920
  %v7922 = vpop.f32.mrf.mxu0
  %7923 = vmatprep.mubr.f32.mxu0 0.0
  %7924 = vmatmul.mubr.f32.gmra.mxu0 %v7579
  %v7925 = vpop.f32.mrf.mxu0
  %v7926 = vadd.f32 0.0, %v7925
  %v7927 = vpop.f32.mrf.mxu0
  %7928 = vmatprep.mubr.f32.mxu0 0.0
  %7929 = vmatmul.mubr.f32.gmra.mxu0 %v7582
  %v7930 = vpop.f32.mrf.mxu0
  %v7931 = vadd.f32 0.0, %v7930
  %v7932 = vpop.f32.mrf.mxu0
  %7933 = vmatprep.mubr.f32.mxu0 0.0
  %7934 = vmatmul.mubr.f32.gmra.mxu0 %v7585
  %v7935 = vpop.f32.mrf.mxu0
  %v7936 = vadd.f32 0.0, %v7935
  %v7937 = vpop.f32.mrf.mxu0
  %7938 = vmatprep.mubr.f32.mxu0 0.0
  %7939 = vmatmul.mubr.f32.gmra.mxu0 %v7588
  %v7940 = vpop.f32.mrf.mxu0
  %v7941 = vadd.f32 0.0, %v7940
  %v7942 = vpop.f32.mrf.mxu0
  %7943 = vmatprep.mubr.f32.mxu0 0.0
  %7944 = vmatmul.mubr.f32.gmra.mxu0 %v7591
  %v7945 = vpop.f32.mrf.mxu0
  %v7946 = vadd.f32 0.0, %v7945
  %v7947 = vpop.f32.mrf.mxu0
  %7948 = vmatprep.mubr.f32.mxu0 0.0
  %7949 = vmatmul.mubr.f32.gmra.mxu0 %v7594
  %v7950 = vpop.f32.mrf.mxu0
  %v7951 = vadd.f32 0.0, %v7950
  %v7952 = vpop.f32.mrf.mxu0
  %7953 = vmatprep.mubr.f32.mxu0 0.0
  %7954 = vmatmul.mubr.f32.gmra.mxu0 %v7597
  %v7955 = vpop.f32.mrf.mxu0
  %v7956 = vadd.f32 0.0, %v7955
  %v7957 = vpop.f32.mrf.mxu0
  %7958 = vmatprep.mubr.f32.mxu0 0.0
  %7959 = vmatmul.mubr.f32.gmra.mxu0 %v7600
  %v7960 = vpop.f32.mrf.mxu0
  %v7961 = vadd.f32 0.0, %v7960
  %v7962 = vpop.f32.mrf.mxu0
  %7963 = vmatprep.mubr.f32.mxu0 0.0
  %7964 = vmatmul.mubr.f32.gmra.mxu0 %v7603
  %v7965 = vpop.f32.mrf.mxu0
  %v7966 = vadd.f32 0.0, %v7965
  %v7967 = vpop.f32.mrf.mxu0
  %7968 = vmatprep.mubr.f32.mxu0 0.0
  %7969 = vmatmul.mubr.f32.gmra.mxu0 %v7606
  %v7970 = vpop.f32.mrf.mxu0
  %v7971 = vadd.f32 0.0, %v7970
  %v7972 = vpop.f32.mrf.mxu0
  %7973 = vmatprep.mubr.f32.mxu0 0.0
  %7974 = vmatmul.mubr.f32.gmra.mxu0 %v7609
  %v7975 = vpop.f32.mrf.mxu0
  %v7976 = vadd.f32 0.0, %v7975
  %v7977 = vpop.f32.mrf.mxu0
  %7978 = vmatprep.mubr.f32.mxu0 0.0
  %7979 = vmatmul.mubr.f32.gmra.mxu0 %v7612
  %v7980 = vpop.f32.mrf.mxu0
  %v7981 = vadd.f32 0.0, %v7980
  %v7982 = vpop.f32.mrf.mxu0
  %7983 = vmatprep.mubr.f32.mxu0 0.0
  %7984 = vmatmul.mubr.f32.gmra.mxu0 %v7615
  %v7985 = vpop.f32.mrf.mxu0
  %v7986 = vadd.f32 0.0, %v7985
  %v7987 = vpop.f32.mrf.mxu0
  %7988 = vmatprep.mubr.f32.mxu0 0.0
  %7989 = vmatmul.mubr.f32.gmra.mxu0 %v7618
  %v7990 = vpop.f32.mrf.mxu0
  %v7991 = vadd.f32 0.0, %v7990
  %v7992 = vpop.f32.mrf.mxu0
  %7993 = vmatprep.mubr.f32.mxu0 0.0
  %7994 = vmatmul.mubr.f32.gmra.mxu0 %v7621
  %v7995 = vpop.f32.mrf.mxu0
  %v7996 = vadd.f32 0.0, %v7995
  %v7997 = vpop.f32.mrf.mxu0
  %7998 = vmatprep.mubr.f32.mxu0 0.0
  %7999 = vmatmul.mubr.f32.gmra.mxu0 %v7624
  %v8000 = vpop.f32.mrf.mxu0
  %v8001 = vadd.f32 0.0, %v8000
  %v8002 = vpop.f32.mrf.mxu0
  %8003 = vmatprep.mubr.f32.mxu0 0.0
  %8004 = vmatmul.mubr.f32.gmra.mxu0 %v7627
  %v8005 = vpop.f32.mrf.mxu0
  %v8006 = vadd.f32 0.0, %v8005
  %v8007 = vpop.f32.mrf.mxu0
  %8008 = vmatprep.mubr.f32.mxu0 0.0
  %8009 = vmatmul.mubr.f32.gmra.mxu0 %v7630
  %v8010 = vpop.f32.mrf.mxu0
  %v8011 = vadd.f32 0.0, %v8010
  %v8012 = vpop.f32.mrf.mxu0
  %8013 = vmatprep.mubr.f32.mxu0 0.0
  %8014 = vmatmul.mubr.f32.gmra.mxu0 %v7633
  %v8015 = vpop.f32.mrf.mxu0
  %v8016 = vadd.f32 0.0, %v8015
  %v8017 = vpop.f32.mrf.mxu0
  %8018 = vmatprep.mubr.f32.mxu0 0.0
  %8019 = vmatmul.mubr.f32.gmra.mxu0 %v7636
  %v8020 = vpop.f32.mrf.mxu0
  %v8021 = vadd.f32 0.0, %v8020
  %v8022 = vpop.f32.mrf.mxu0
  %8023 = vmatprep.mubr.f32.mxu0 0.0
  %8024 = vmatmul.mubr.f32.gmra.mxu0 %v7639
  %v8025 = vpop.f32.mrf.mxu0
  %v8026 = vadd.f32 0.0, %v8025
  %v8027 = vpop.f32.mrf.mxu0
  %8028 = vdwg.mxu0
  %v8030 = vsel %vm79, %v7318, 0
  %v8033 = vsel %vm79, %v7319, 0
  %v8036 = vsel %vm79, %v7320, 0
  %v8039 = vsel %vm79, %v7321, 0
  %v8042 = vsel %vm79, %v7322, 0
  %v8045 = vsel %vm79, %v7323, 0
  %v8048 = vsel %vm79, %v7324, 0
  %v8051 = vsel %vm79, %v7325, 0
  %v8054 = vsel %vm79, %v7326, 0
  %v8057 = vsel %vm79, %v7327, 0
  %v8060 = vsel %vm79, %v7328, 0
  %v8063 = vsel %vm79, %v7329, 0
  %v8066 = vsel %vm79, %v7330, 0
  %v8069 = vsel %vm79, %v7331, 0
  %v8072 = vsel %vm79, %v7332, 0
  %v8075 = vsel %vm79, %v7333, 0
  %v8078 = vsel %vm79, %v7334, 0
  %v8081 = vsel %vm79, %v7335, 0
  %v8084 = vsel %vm79, %v7336, 0
  %v8087 = vsel %vm79, %v7337, 0
  %v8090 = vsel %vm79, %v7338, 0
  %v8093 = vsel %vm79, %v7339, 0
  %v8096 = vsel %vm79, %v7340, 0
  %v8099 = vsel %vm79, %v7341, 0
  %v8102 = vsel %vm79, %v7342, 0
  %v8105 = vsel %vm79, %v7343, 0
  %v8108 = vsel %vm79, %v7344, 0
  %v8111 = vsel %vm79, %v7345, 0
  %v8114 = vsel %vm79, %v7346, 0
  %v8117 = vsel %vm79, %v7347, 0
  %v8120 = vsel %vm79, %v7348, 0
  %v8123 = vsel %vm79, %v7349, 0
  %v8126 = vsel %vm79, %v7350, 0
  %v8129 = vsel %vm79, %v7351, 0
  %v8132 = vsel %vm79, %v7352, 0
  %v8135 = vsel %vm79, %v7353, 0
  %v8138 = vsel %vm79, %v7354, 0
  %v8141 = vsel %vm79, %v7355, 0
  %v8144 = vsel %vm79, %v7356, 0
  %v8147 = vsel %vm79, %v7357, 0
  %v8150 = vsel %vm79, %v7358, 0
  %v8153 = vsel %vm79, %v7359, 0
  %v8156 = vsel %vm79, %v7360, 0
  %v8159 = vsel %vm79, %v7361, 0
  %v8162 = vsel %vm79, %v7362, 0
  %v8165 = vsel %vm79, %v7363, 0
  %v8168 = vsel %vm79, %v7364, 0
  %v8171 = vsel %vm79, %v7365, 0
  %v8174 = vsel %vm79, %v7366, 0
  %v8177 = vsel %vm79, %v7367, 0
  %v8180 = vsel %vm79, %v7368, 0
  %v8183 = vsel %vm79, %v7369, 0
  %v8186 = vsel %vm79, %v7370, 0
  %v8189 = vsel %vm79, %v7371, 0
  %v8192 = vsel %vm79, %v7372, 0
  %v8195 = vsel %vm79, %v7373, 0
  %v8198 = vsel %vm79, %v7374, 0
  %v8201 = vsel %vm79, %v7375, 0
  %v8204 = vsel %vm79, %v7376, 0
  %v8207 = vsel %vm79, %v7377, 0
  %v8210 = vsel %vm79, %v7378, 0
  %v8213 = vsel %vm79, %v7379, 0
  %v8216 = vsel %vm79, %v7380, 0
  %v8219 = vsel %vm79, %v7381, 0
  %v8222 = vsel %vm621, %v7382, 0
  %8224 = vmatprep.subr.mxu0 0.0
  %8225 = vmatpush1.msra.mxu0 0.0
  %8226 = vmatprep.subr.mxu0 0.0
  %8227 = vmatpush1.msra.mxu0 0.0
  %8228 = vmatprep.subr.mxu0 0.0
  %8229 = vmatpush1.msra.mxu0 0.0
  %8230 = vmatprep.subr.mxu0 0.0
  %8231 = vmatpush1.msra.mxu0 0.0
  %8232 = vmatprep.subr.mxu0 0.0
  %8233 = vmatpush1.msra.mxu0 0.0
  %8234 = vmatprep.subr.mxu0 0.0
  %8235 = vmatpush1.msra.mxu0 0.0
  %8236 = vmatprep.subr.mxu0 0.0
  %8237 = vmatpush1.msra.mxu0 0.0
  %8238 = vmatprep.subr.mxu0 0.0
  %8239 = vmatpush1.msra.mxu0 0.0
  %8240 = vmatprep.subr.mxu0 0.0
  %8241 = vmatpush1.msra.mxu0 0.0
  %8242 = vmatprep.subr.mxu0 0.0
  %8243 = vmatpush1.msra.mxu0 0.0
  %8244 = vmatprep.subr.mxu0 0.0
  %8245 = vmatpush1.msra.mxu0 0.0
  %8246 = vmatprep.subr.mxu0 0.0
  %8247 = vmatpush1.msra.mxu0 0.0
  %8248 = vmatprep.subr.mxu0 0.0
  %8249 = vmatpush1.msra.mxu0 0.0
  %8250 = vmatprep.subr.mxu0 0.0
  %8251 = vmatpush1.msra.mxu0 0.0
  %8252 = vmatprep.subr.mxu0 0.0
  %8253 = vmatpush1.msra.mxu0 0.0
  %8254 = vmatprep.subr.mxu0 0.0
  %8255 = vmatpush1.msra.mxu0 %v8222
  %8256 = vmatprep.subr.mxu0 0.0
  %8257 = vmatpush2.msra.mxu0 0.0
  %8258 = vmatprep.subr.mxu0 0.0
  %8259 = vmatpush2.msra.mxu0 0.0
  %8260 = vmatprep.subr.mxu0 0.0
  %8261 = vmatpush2.msra.mxu0 0.0
  %8262 = vmatprep.subr.mxu0 0.0
  %8263 = vmatpush2.msra.mxu0 0.0
  %8264 = vmatprep.subr.mxu0 0.0
  %8265 = vmatpush2.msra.mxu0 0.0
  %8266 = vmatprep.subr.mxu0 0.0
  %8267 = vmatpush2.msra.mxu0 0.0
  %8268 = vmatprep.subr.mxu0 0.0
  %8269 = vmatpush2.msra.mxu0 0.0
  %8270 = vmatprep.subr.mxu0 0.0
  %8271 = vmatpush2.msra.mxu0 0.0
  %8272 = vmatprep.subr.mxu0 0.0
  %8273 = vmatpush2.msra.mxu0 0.0
  %8274 = vmatprep.subr.mxu0 0.0
  %8275 = vmatpush2.msra.mxu0 0.0
  %8276 = vmatprep.subr.mxu0 0.0
  %8277 = vmatpush2.msra.mxu0 0.0
  %8278 = vmatprep.subr.mxu0 0.0
  %8279 = vmatpush2.msra.mxu0 0.0
  %8280 = vmatprep.subr.mxu0 0.0
  %8281 = vmatpush2.msra.mxu0 0.0
  %8282 = vmatprep.subr.mxu0 0.0
  %8283 = vmatpush2.msra.mxu0 0.0
  %8284 = vmatprep.subr.mxu0 0.0
  %8285 = vmatpush2.msra.mxu0 0.0
  %8286 = vmatprep.subr.mxu0 0.0
  %8287 = vmatpush2.msra.mxu0 0.0
  %8288 = vmatprep.mubr.f32.mxu0 0.0
  %8289 = vmatmul.mubr.f32.gmra.mxu0 %v8030
  %v8290 = vpop.f32.mrf.mxu0
  %v8291 = vadd.f32 %v7711, %v8290
  %v8292 = vpop.f32.mrf.mxu0
  %8293 = vmatprep.mubr.f32.mxu0 0.0
  %8294 = vmatmul.mubr.f32.gmra.mxu0 %v8033
  %v8295 = vpop.f32.mrf.mxu0
  %v8296 = vadd.f32 %v7716, %v8295
  %v8297 = vpop.f32.mrf.mxu0
  %8298 = vmatprep.mubr.f32.mxu0 0.0
  %8299 = vmatmul.mubr.f32.gmra.mxu0 %v8036
  %v8300 = vpop.f32.mrf.mxu0
  %v8301 = vadd.f32 %v7721, %v8300
  %v8302 = vpop.f32.mrf.mxu0
  %8303 = vmatprep.mubr.f32.mxu0 0.0
  %8304 = vmatmul.mubr.f32.gmra.mxu0 %v8039
  %v8305 = vpop.f32.mrf.mxu0
  %v8306 = vadd.f32 %v7726, %v8305
  %v8307 = vpop.f32.mrf.mxu0
  %8308 = vmatprep.mubr.f32.mxu0 0.0
  %8309 = vmatmul.mubr.f32.gmra.mxu0 %v8042
  %v8310 = vpop.f32.mrf.mxu0
  %v8311 = vadd.f32 %v7731, %v8310
  %v8312 = vpop.f32.mrf.mxu0
  %8313 = vmatprep.mubr.f32.mxu0 0.0
  %8314 = vmatmul.mubr.f32.gmra.mxu0 %v8045
  %v8315 = vpop.f32.mrf.mxu0
  %v8316 = vadd.f32 %v7736, %v8315
  %v8317 = vpop.f32.mrf.mxu0
  %8318 = vmatprep.mubr.f32.mxu0 0.0
  %8319 = vmatmul.mubr.f32.gmra.mxu0 %v8048
  %v8320 = vpop.f32.mrf.mxu0
  %v8321 = vadd.f32 %v7741, %v8320
  %v8322 = vpop.f32.mrf.mxu0
  %8323 = vmatprep.mubr.f32.mxu0 0.0
  %8324 = vmatmul.mubr.f32.gmra.mxu0 %v8051
  %v8325 = vpop.f32.mrf.mxu0
  %v8326 = vadd.f32 %v7746, %v8325
  %v8327 = vpop.f32.mrf.mxu0
  %8328 = vmatprep.mubr.f32.mxu0 0.0
  %8329 = vmatmul.mubr.f32.gmra.mxu0 %v8054
  %v8330 = vpop.f32.mrf.mxu0
  %v8331 = vadd.f32 %v7751, %v8330
  %v8332 = vpop.f32.mrf.mxu0
  %8333 = vmatprep.mubr.f32.mxu0 0.0
  %8334 = vmatmul.mubr.f32.gmra.mxu0 %v8057
  %v8335 = vpop.f32.mrf.mxu0
  %v8336 = vadd.f32 %v7756, %v8335
  %v8337 = vpop.f32.mrf.mxu0
  %8338 = vmatprep.mubr.f32.mxu0 0.0
  %8339 = vmatmul.mubr.f32.gmra.mxu0 %v8060
  %v8340 = vpop.f32.mrf.mxu0
  %v8341 = vadd.f32 %v7761, %v8340
  %v8342 = vpop.f32.mrf.mxu0
  %8343 = vmatprep.mubr.f32.mxu0 0.0
  %8344 = vmatmul.mubr.f32.gmra.mxu0 %v8063
  %v8345 = vpop.f32.mrf.mxu0
  %v8346 = vadd.f32 %v7766, %v8345
  %v8347 = vpop.f32.mrf.mxu0
  %8348 = vmatprep.mubr.f32.mxu0 0.0
  %8349 = vmatmul.mubr.f32.gmra.mxu0 %v8066
  %v8350 = vpop.f32.mrf.mxu0
  %v8351 = vadd.f32 %v7771, %v8350
  %v8352 = vpop.f32.mrf.mxu0
  %8353 = vmatprep.mubr.f32.mxu0 0.0
  %8354 = vmatmul.mubr.f32.gmra.mxu0 %v8069
  %v8355 = vpop.f32.mrf.mxu0
  %v8356 = vadd.f32 %v7776, %v8355
  %v8357 = vpop.f32.mrf.mxu0
  %8358 = vmatprep.mubr.f32.mxu0 0.0
  %8359 = vmatmul.mubr.f32.gmra.mxu0 %v8072
  %v8360 = vpop.f32.mrf.mxu0
  %v8361 = vadd.f32 %v7781, %v8360
  %v8362 = vpop.f32.mrf.mxu0
  %8363 = vmatprep.mubr.f32.mxu0 0.0
  %8364 = vmatmul.mubr.f32.gmra.mxu0 %v8075
  %v8365 = vpop.f32.mrf.mxu0
  %v8366 = vadd.f32 %v7786, %v8365
  %v8367 = vpop.f32.mrf.mxu0
  %8368 = vmatprep.mubr.f32.mxu0 0.0
  %8369 = vmatmul.mubr.f32.gmra.mxu0 %v8078
  %v8370 = vpop.f32.mrf.mxu0
  %v8371 = vadd.f32 %v7791, %v8370
  %v8372 = vpop.f32.mrf.mxu0
  %8373 = vmatprep.mubr.f32.mxu0 0.0
  %8374 = vmatmul.mubr.f32.gmra.mxu0 %v8081
  %v8375 = vpop.f32.mrf.mxu0
  %v8376 = vadd.f32 %v7796, %v8375
  %v8377 = vpop.f32.mrf.mxu0
  %8378 = vmatprep.mubr.f32.mxu0 0.0
  %8379 = vmatmul.mubr.f32.gmra.mxu0 %v8084
  %v8380 = vpop.f32.mrf.mxu0
  %v8381 = vadd.f32 %v7801, %v8380
  %v8382 = vpop.f32.mrf.mxu0
  %8383 = vmatprep.mubr.f32.mxu0 0.0
  %8384 = vmatmul.mubr.f32.gmra.mxu0 %v8087
  %v8385 = vpop.f32.mrf.mxu0
  %v8386 = vadd.f32 %v7806, %v8385
  %v8387 = vpop.f32.mrf.mxu0
  %8388 = vmatprep.mubr.f32.mxu0 0.0
  %8389 = vmatmul.mubr.f32.gmra.mxu0 %v8090
  %v8390 = vpop.f32.mrf.mxu0
  %v8391 = vadd.f32 %v7811, %v8390
  %v8392 = vpop.f32.mrf.mxu0
  %8393 = vmatprep.mubr.f32.mxu0 0.0
  %8394 = vmatmul.mubr.f32.gmra.mxu0 %v8093
  %v8395 = vpop.f32.mrf.mxu0
  %v8396 = vadd.f32 %v7816, %v8395
  %v8397 = vpop.f32.mrf.mxu0
  %8398 = vmatprep.mubr.f32.mxu0 0.0
  %8399 = vmatmul.mubr.f32.gmra.mxu0 %v8096
  %v8400 = vpop.f32.mrf.mxu0
  %v8401 = vadd.f32 %v7821, %v8400
  %v8402 = vpop.f32.mrf.mxu0
  %8403 = vmatprep.mubr.f32.mxu0 0.0
  %8404 = vmatmul.mubr.f32.gmra.mxu0 %v8099
  %v8405 = vpop.f32.mrf.mxu0
  %v8406 = vadd.f32 %v7826, %v8405
  %v8407 = vpop.f32.mrf.mxu0
  %8408 = vmatprep.mubr.f32.mxu0 0.0
  %8409 = vmatmul.mubr.f32.gmra.mxu0 %v8102
  %v8410 = vpop.f32.mrf.mxu0
  %v8411 = vadd.f32 %v7831, %v8410
  %v8412 = vpop.f32.mrf.mxu0
  %8413 = vmatprep.mubr.f32.mxu0 0.0
  %8414 = vmatmul.mubr.f32.gmra.mxu0 %v8105
  %v8415 = vpop.f32.mrf.mxu0
  %v8416 = vadd.f32 %v7836, %v8415
  %v8417 = vpop.f32.mrf.mxu0
  %8418 = vmatprep.mubr.f32.mxu0 0.0
  %8419 = vmatmul.mubr.f32.gmra.mxu0 %v8108
  %v8420 = vpop.f32.mrf.mxu0
  %v8421 = vadd.f32 %v7841, %v8420
  %v8422 = vpop.f32.mrf.mxu0
  %8423 = vmatprep.mubr.f32.mxu0 0.0
  %8424 = vmatmul.mubr.f32.gmra.mxu0 %v8111
  %v8425 = vpop.f32.mrf.mxu0
  %v8426 = vadd.f32 %v7846, %v8425
  %v8427 = vpop.f32.mrf.mxu0
  %8428 = vmatprep.mubr.f32.mxu0 0.0
  %8429 = vmatmul.mubr.f32.gmra.mxu0 %v8114
  %v8430 = vpop.f32.mrf.mxu0
  %v8431 = vadd.f32 %v7851, %v8430
  %v8432 = vpop.f32.mrf.mxu0
  %8433 = vmatprep.mubr.f32.mxu0 0.0
  %8434 = vmatmul.mubr.f32.gmra.mxu0 %v8117
  %v8435 = vpop.f32.mrf.mxu0
  %v8436 = vadd.f32 %v7856, %v8435
  %v8437 = vpop.f32.mrf.mxu0
  %8438 = vmatprep.mubr.f32.mxu0 0.0
  %8439 = vmatmul.mubr.f32.gmra.mxu0 %v8120
  %v8440 = vpop.f32.mrf.mxu0
  %v8441 = vadd.f32 %v7861, %v8440
  %v8442 = vpop.f32.mrf.mxu0
  %8443 = vmatprep.mubr.f32.mxu0 0.0
  %8444 = vmatmul.mubr.f32.gmra.mxu0 %v8123
  %v8445 = vpop.f32.mrf.mxu0
  %v8446 = vadd.f32 %v7866, %v8445
  %v8447 = vpop.f32.mrf.mxu0
  %8448 = vmatprep.mubr.f32.mxu0 0.0
  %8449 = vmatmul.mubr.f32.gmra.mxu0 %v8126
  %v8450 = vpop.f32.mrf.mxu0
  %v8451 = vadd.f32 %v7871, %v8450
  %v8452 = vpop.f32.mrf.mxu0
  %8453 = vmatprep.mubr.f32.mxu0 0.0
  %8454 = vmatmul.mubr.f32.gmra.mxu0 %v8129
  %v8455 = vpop.f32.mrf.mxu0
  %v8456 = vadd.f32 %v7876, %v8455
  %v8457 = vpop.f32.mrf.mxu0
  %8458 = vmatprep.mubr.f32.mxu0 0.0
  %8459 = vmatmul.mubr.f32.gmra.mxu0 %v8132
  %v8460 = vpop.f32.mrf.mxu0
  %v8461 = vadd.f32 %v7881, %v8460
  %v8462 = vpop.f32.mrf.mxu0
  %8463 = vmatprep.mubr.f32.mxu0 0.0
  %8464 = vmatmul.mubr.f32.gmra.mxu0 %v8135
  %v8465 = vpop.f32.mrf.mxu0
  %v8466 = vadd.f32 %v7886, %v8465
  %v8467 = vpop.f32.mrf.mxu0
  %8468 = vmatprep.mubr.f32.mxu0 0.0
  %8469 = vmatmul.mubr.f32.gmra.mxu0 %v8138
  %v8470 = vpop.f32.mrf.mxu0
  %v8471 = vadd.f32 %v7891, %v8470
  %v8472 = vpop.f32.mrf.mxu0
  %8473 = vmatprep.mubr.f32.mxu0 0.0
  %8474 = vmatmul.mubr.f32.gmra.mxu0 %v8141
  %v8475 = vpop.f32.mrf.mxu0
  %v8476 = vadd.f32 %v7896, %v8475
  %v8477 = vpop.f32.mrf.mxu0
  %8478 = vmatprep.mubr.f32.mxu0 0.0
  %8479 = vmatmul.mubr.f32.gmra.mxu0 %v8144
  %v8480 = vpop.f32.mrf.mxu0
  %v8481 = vadd.f32 %v7901, %v8480
  %v8482 = vpop.f32.mrf.mxu0
  %8483 = vmatprep.mubr.f32.mxu0 0.0
  %8484 = vmatmul.mubr.f32.gmra.mxu0 %v8147
  %v8485 = vpop.f32.mrf.mxu0
  %v8486 = vadd.f32 %v7906, %v8485
  %v8487 = vpop.f32.mrf.mxu0
  %8488 = vmatprep.mubr.f32.mxu0 0.0
  %8489 = vmatmul.mubr.f32.gmra.mxu0 %v8150
  %v8490 = vpop.f32.mrf.mxu0
  %v8491 = vadd.f32 %v7911, %v8490
  %v8492 = vpop.f32.mrf.mxu0
  %8493 = vmatprep.mubr.f32.mxu0 0.0
  %8494 = vmatmul.mubr.f32.gmra.mxu0 %v8153
  %v8495 = vpop.f32.mrf.mxu0
  %v8496 = vadd.f32 %v7916, %v8495
  %v8497 = vpop.f32.mrf.mxu0
  %8498 = vmatprep.mubr.f32.mxu0 0.0
  %8499 = vmatmul.mubr.f32.gmra.mxu0 %v8156
  %v8500 = vpop.f32.mrf.mxu0
  %v8501 = vadd.f32 %v7921, %v8500
  %v8502 = vpop.f32.mrf.mxu0
  %8503 = vmatprep.mubr.f32.mxu0 0.0
  %8504 = vmatmul.mubr.f32.gmra.mxu0 %v8159
  %v8505 = vpop.f32.mrf.mxu0
  %v8506 = vadd.f32 %v7926, %v8505
  %v8507 = vpop.f32.mrf.mxu0
  %8508 = vmatprep.mubr.f32.mxu0 0.0
  %8509 = vmatmul.mubr.f32.gmra.mxu0 %v8162
  %v8510 = vpop.f32.mrf.mxu0
  %v8511 = vadd.f32 %v7931, %v8510
  %v8512 = vpop.f32.mrf.mxu0
  %8513 = vmatprep.mubr.f32.mxu0 0.0
  %8514 = vmatmul.mubr.f32.gmra.mxu0 %v8165
  %v8515 = vpop.f32.mrf.mxu0
  %v8516 = vadd.f32 %v7936, %v8515
  %v8517 = vpop.f32.mrf.mxu0
  %8518 = vmatprep.mubr.f32.mxu0 0.0
  %8519 = vmatmul.mubr.f32.gmra.mxu0 %v8168
  %v8520 = vpop.f32.mrf.mxu0
  %v8521 = vadd.f32 %v7941, %v8520
  %v8522 = vpop.f32.mrf.mxu0
  %8523 = vmatprep.mubr.f32.mxu0 0.0
  %8524 = vmatmul.mubr.f32.gmra.mxu0 %v8171
  %v8525 = vpop.f32.mrf.mxu0
  %v8526 = vadd.f32 %v7946, %v8525
  %v8527 = vpop.f32.mrf.mxu0
  %8528 = vmatprep.mubr.f32.mxu0 0.0
  %8529 = vmatmul.mubr.f32.gmra.mxu0 %v8174
  %v8530 = vpop.f32.mrf.mxu0
  %v8531 = vadd.f32 %v7951, %v8530
  %v8532 = vpop.f32.mrf.mxu0
  %8533 = vmatprep.mubr.f32.mxu0 0.0
  %8534 = vmatmul.mubr.f32.gmra.mxu0 %v8177
  %v8535 = vpop.f32.mrf.mxu0
  %v8536 = vadd.f32 %v7956, %v8535
  %v8537 = vpop.f32.mrf.mxu0
  %8538 = vmatprep.mubr.f32.mxu0 0.0
  %8539 = vmatmul.mubr.f32.gmra.mxu0 %v8180
  %v8540 = vpop.f32.mrf.mxu0
  %v8541 = vadd.f32 %v7961, %v8540
  %v8542 = vpop.f32.mrf.mxu0
  %8543 = vmatprep.mubr.f32.mxu0 0.0
  %8544 = vmatmul.mubr.f32.gmra.mxu0 %v8183
  %v8545 = vpop.f32.mrf.mxu0
  %v8546 = vadd.f32 %v7966, %v8545
  %v8547 = vpop.f32.mrf.mxu0
  %8548 = vmatprep.mubr.f32.mxu0 0.0
  %8549 = vmatmul.mubr.f32.gmra.mxu0 %v8186
  %v8550 = vpop.f32.mrf.mxu0
  %v8551 = vadd.f32 %v7971, %v8550
  %v8552 = vpop.f32.mrf.mxu0
  %8553 = vmatprep.mubr.f32.mxu0 0.0
  %8554 = vmatmul.mubr.f32.gmra.mxu0 %v8189
  %v8555 = vpop.f32.mrf.mxu0
  %v8556 = vadd.f32 %v7976, %v8555
  %v8557 = vpop.f32.mrf.mxu0
  %8558 = vmatprep.mubr.f32.mxu0 0.0
  %8559 = vmatmul.mubr.f32.gmra.mxu0 %v8192
  %v8560 = vpop.f32.mrf.mxu0
  %v8561 = vadd.f32 %v7981, %v8560
  %v8562 = vpop.f32.mrf.mxu0
  %8563 = vmatprep.mubr.f32.mxu0 0.0
  %8564 = vmatmul.mubr.f32.gmra.mxu0 %v8195
  %v8565 = vpop.f32.mrf.mxu0
  %v8566 = vadd.f32 %v7986, %v8565
  %v8567 = vpop.f32.mrf.mxu0
  %8568 = vmatprep.mubr.f32.mxu0 0.0
  %8569 = vmatmul.mubr.f32.gmra.mxu0 %v8198
  %v8570 = vpop.f32.mrf.mxu0
  %v8571 = vadd.f32 %v7991, %v8570
  %v8572 = vpop.f32.mrf.mxu0
  %8573 = vmatprep.mubr.f32.mxu0 0.0
  %8574 = vmatmul.mubr.f32.gmra.mxu0 %v8201
  %v8575 = vpop.f32.mrf.mxu0
  %v8576 = vadd.f32 %v7996, %v8575
  %v8577 = vpop.f32.mrf.mxu0
  %8578 = vmatprep.mubr.f32.mxu0 0.0
  %8579 = vmatmul.mubr.f32.gmra.mxu0 %v8204
  %v8580 = vpop.f32.mrf.mxu0
  %v8581 = vadd.f32 %v8001, %v8580
  %v8582 = vpop.f32.mrf.mxu0
  %8583 = vmatprep.mubr.f32.mxu0 0.0
  %8584 = vmatmul.mubr.f32.gmra.mxu0 %v8207
  %v8585 = vpop.f32.mrf.mxu0
  %v8586 = vadd.f32 %v8006, %v8585
  %v8587 = vpop.f32.mrf.mxu0
  %8588 = vmatprep.mubr.f32.mxu0 0.0
  %8589 = vmatmul.mubr.f32.gmra.mxu0 %v8210
  %v8590 = vpop.f32.mrf.mxu0
  %v8591 = vadd.f32 %v8011, %v8590
  %v8592 = vpop.f32.mrf.mxu0
  %8593 = vmatprep.mubr.f32.mxu0 0.0
  %8594 = vmatmul.mubr.f32.gmra.mxu0 %v8213
  %v8595 = vpop.f32.mrf.mxu0
  %v8596 = vadd.f32 %v8016, %v8595
  %v8597 = vpop.f32.mrf.mxu0
  %8598 = vmatprep.mubr.f32.mxu0 0.0
  %8599 = vmatmul.mubr.f32.gmra.mxu0 %v8216
  %v8600 = vpop.f32.mrf.mxu0
  %v8601 = vadd.f32 %v8021, %v8600
  %v8602 = vpop.f32.mrf.mxu0
  %8603 = vmatprep.mubr.f32.mxu0 0.0
  %8604 = vmatmul.mubr.f32.gmra.mxu0 %v8219
  %v8605 = vpop.f32.mrf.mxu0
  %v8606 = vadd.f32 %v8026, %v8605
  %v8607 = vpop.f32.mrf.mxu0
  %8608 = vdwg.mxu0
  %v8609 = vld [vmem:[#allocation2 + $0x2] sm:$0xff]
  %v8610 = vld [vmem:[#allocation2 + $0xa] sm:$0xff]
  %v8611 = vld [vmem:[#allocation2 + $0x1a] sm:$0xff]
  %v8612 = vld [vmem:[#allocation2 + $0x22] sm:$0xff]
  %v8613 = vld [vmem:[#allocation2 + $0x32] sm:$0xff]
  %v8614 = vld [vmem:[#allocation2 + $0x3a] sm:$0xff]
  %v8615 = vld [vmem:[#allocation2 + $0x4a] sm:$0xff]
  %v8616 = vld [vmem:[#allocation2 + $0x52] sm:$0xff]
  %v8617 = vld [vmem:[#allocation2 + $0x62] sm:$0xff]
  %v8618 = vld [vmem:[#allocation2 + $0x6a] sm:$0xff]
  %v8619 = vld [vmem:[#allocation2 + $0x7a] sm:$0xff]
  %v8620 = vld [vmem:[#allocation2 + $0x82] sm:$0xff]
  %v8621 = vld [vmem:[#allocation2 + $0x92] sm:$0xff]
  %v8622 = vld [vmem:[#allocation2 + $0x9a] sm:$0xff]
  %v8623 = vld [vmem:[#allocation2 + $0xaa] sm:$0xff]
  %v8624 = vld [vmem:[#allocation2 + $0xb2] sm:$0xff]
  %v8625 = vld [vmem:[#allocation2 + $0xc2] sm:$0xff]
  %v8626 = vld [vmem:[#allocation2 + $0xca] sm:$0xff]
  %v8627 = vld [vmem:[#allocation2 + $0xda] sm:$0xff]
  %v8628 = vld [vmem:[#allocation2 + $0xe2] sm:$0xff]
  %v8629 = vld [vmem:[#allocation2 + $0xf2] sm:$0xff]
  %v8630 = vld [vmem:[#allocation2 + $0xfa] sm:$0xff]
  %v8631 = vld [vmem:[#allocation2 + $0x10a] sm:$0xff]
  %v8632 = vld [vmem:[#allocation2 + $0x112] sm:$0xff]
  %v8633 = vld [vmem:[#allocation2 + $0x122] sm:$0xff]
  %v8634 = vld [vmem:[#allocation2 + $0x12a] sm:$0xff]
  %v8635 = vld [vmem:[#allocation2 + $0x13a] sm:$0xff]
  %v8636 = vld [vmem:[#allocation2 + $0x142] sm:$0xff]
  %v8637 = vld [vmem:[#allocation2 + $0x152] sm:$0xff]
  %v8638 = vld [vmem:[#allocation2 + $0x15a] sm:$0xff]
  %v8639 = vld [vmem:[#allocation2 + $0x16a] sm:$0xff]
  %v8640 = vld [vmem:[#allocation2 + $0x172] sm:$0xff]
  %v8641 = vld [vmem:[#allocation2 + $0x1b2] sm:$0xff]
  %v8642 = vld [vmem:[#allocation2 + $0x1ba] sm:$0xff]
  %v8643 = vld [vmem:[#allocation2 + $0x1ca] sm:$0xff]
  %v8644 = vld [vmem:[#allocation2 + $0x1d2] sm:$0xff]
  %v8645 = vld [vmem:[#allocation2 + $0x1e2] sm:$0xff]
  %v8646 = vld [vmem:[#allocation2 + $0x1ea] sm:$0xff]
  %v8647 = vld [vmem:[#allocation2 + $0x1fa] sm:$0xff]
  %v8648 = vld [vmem:[#allocation2 + $0x202] sm:$0xff]
  %v8649 = vld [vmem:[#allocation2 + $0x212] sm:$0xff]
  %v8650 = vld [vmem:[#allocation2 + $0x21a] sm:$0xff]
  %v8651 = vld [vmem:[#allocation2 + $0x22a] sm:$0xff]
  %v8652 = vld [vmem:[#allocation2 + $0x232] sm:$0xff]
  %v8653 = vld [vmem:[#allocation2 + $0x242] sm:$0xff]
  %v8654 = vld [vmem:[#allocation2 + $0x24a] sm:$0xff]
  %v8655 = vld [vmem:[#allocation2 + $0x25a] sm:$0xff]
  %v8656 = vld [vmem:[#allocation2 + $0x262] sm:$0xff]
  %v8657 = vld [vmem:[#allocation2 + $0x272] sm:$0xff]
  %v8658 = vld [vmem:[#allocation2 + $0x27a] sm:$0xff]
  %v8659 = vld [vmem:[#allocation2 + $0x28a] sm:$0xff]
  %v8660 = vld [vmem:[#allocation2 + $0x292] sm:$0xff]
  %v8661 = vld [vmem:[#allocation2 + $0x2a2] sm:$0xff]
  %v8662 = vld [vmem:[#allocation2 + $0x2aa] sm:$0xff]
  %v8663 = vld [vmem:[#allocation2 + $0x2ba] sm:$0xff]
  %v8664 = vld [vmem:[#allocation2 + $0x2c2] sm:$0xff]
  %v8665 = vld [vmem:[#allocation2 + $0x2d2] sm:$0xff]
  %v8666 = vld [vmem:[#allocation2 + $0x2da] sm:$0xff]
  %v8667 = vld [vmem:[#allocation2 + $0x2ea] sm:$0xff]
  %v8668 = vld [vmem:[#allocation2 + $0x2f2] sm:$0xff]
  %v8669 = vld [vmem:[#allocation2 + $0x302] sm:$0xff]
  %v8670 = vld [vmem:[#allocation2 + $0x30a] sm:$0xff]
  %v8671 = vld [vmem:[#allocation2 + $0x31a] sm:$0xff]
  %v8672 = vld [vmem:[#allocation2 + $0x322] sm:$0xff]
  %s8673 = scalar_lea.vmem %s2, 8
  %v8674 = vld [vmem:[%s8673] sm:$0xf]
  %v8676 = vsel %vm79, %v8609, 0
  %v8679 = vsel %vm79, %v8610, 0
  %v8682 = vsel %vm79, %v8611, 0
  %v8685 = vsel %vm79, %v8612, 0
  %v8688 = vsel %vm79, %v8613, 0
  %v8691 = vsel %vm79, %v8614, 0
  %v8694 = vsel %vm79, %v8615, 0
  %v8697 = vsel %vm79, %v8616, 0
  %v8700 = vsel %vm79, %v8617, 0
  %v8703 = vsel %vm79, %v8618, 0
  %v8706 = vsel %vm79, %v8619, 0
  %v8709 = vsel %vm79, %v8620, 0
  %v8712 = vsel %vm79, %v8621, 0
  %v8715 = vsel %vm79, %v8622, 0
  %v8718 = vsel %vm79, %v8623, 0
  %v8721 = vsel %vm79, %v8624, 0
  %v8724 = vsel %vm79, %v8625, 0
  %v8727 = vsel %vm79, %v8626, 0
  %v8730 = vsel %vm79, %v8627, 0
  %v8733 = vsel %vm79, %v8628, 0
  %v8736 = vsel %vm79, %v8629, 0
  %v8739 = vsel %vm79, %v8630, 0
  %v8742 = vsel %vm79, %v8631, 0
  %v8745 = vsel %vm79, %v8632, 0
  %v8748 = vsel %vm79, %v8633, 0
  %v8751 = vsel %vm79, %v8634, 0
  %v8754 = vsel %vm79, %v8635, 0
  %v8757 = vsel %vm79, %v8636, 0
  %v8760 = vsel %vm79, %v8637, 0
  %v8763 = vsel %vm79, %v8638, 0
  %v8766 = vsel %vm79, %v8639, 0
  %v8769 = vsel %vm79, %v8640, 0
  %v8772 = vsel %vm79, %v8641, 0
  %v8775 = vsel %vm79, %v8642, 0
  %v8778 = vsel %vm79, %v8643, 0
  %v8781 = vsel %vm79, %v8644, 0
  %v8784 = vsel %vm79, %v8645, 0
  %v8787 = vsel %vm79, %v8646, 0
  %v8790 = vsel %vm79, %v8647, 0
  %v8793 = vsel %vm79, %v8648, 0
  %v8796 = vsel %vm79, %v8649, 0
  %v8799 = vsel %vm79, %v8650, 0
  %v8802 = vsel %vm79, %v8651, 0
  %v8805 = vsel %vm79, %v8652, 0
  %v8808 = vsel %vm79, %v8653, 0
  %v8811 = vsel %vm79, %v8654, 0
  %v8814 = vsel %vm79, %v8655, 0
  %v8817 = vsel %vm79, %v8656, 0
  %v8820 = vsel %vm79, %v8657, 0
  %v8823 = vsel %vm79, %v8658, 0
  %v8826 = vsel %vm79, %v8659, 0
  %v8829 = vsel %vm79, %v8660, 0
  %v8832 = vsel %vm79, %v8661, 0
  %v8835 = vsel %vm79, %v8662, 0
  %v8838 = vsel %vm79, %v8663, 0
  %v8841 = vsel %vm79, %v8664, 0
  %v8844 = vsel %vm79, %v8665, 0
  %v8847 = vsel %vm79, %v8666, 0
  %v8850 = vsel %vm79, %v8667, 0
  %v8853 = vsel %vm79, %v8668, 0
  %v8856 = vsel %vm79, %v8669, 0
  %v8859 = vsel %vm79, %v8670, 0
  %v8862 = vsel %vm79, %v8671, 0
  %v8865 = vsel %vm79, %v8672, 0
  %v8868 = vsel %vm621, %v8674, 0
  %8870 = vmatprep.subr.mxu0 0.0
  %8871 = vmatpush1.msra.mxu0 0.0
  %8872 = vmatprep.subr.mxu0 0.0
  %8873 = vmatpush1.msra.mxu0 0.0
  %8874 = vmatprep.subr.mxu0 0.0
  %8875 = vmatpush1.msra.mxu0 0.0
  %8876 = vmatprep.subr.mxu0 0.0
  %8877 = vmatpush1.msra.mxu0 0.0
  %8878 = vmatprep.subr.mxu0 0.0
  %8879 = vmatpush1.msra.mxu0 0.0
  %8880 = vmatprep.subr.mxu0 0.0
  %8881 = vmatpush1.msra.mxu0 0.0
  %8882 = vmatprep.subr.mxu0 0.0
  %8883 = vmatpush1.msra.mxu0 0.0
  %8884 = vmatprep.subr.mxu0 0.0
  %8885 = vmatpush1.msra.mxu0 0.0
  %8886 = vmatprep.subr.mxu0 0.0
  %8887 = vmatpush1.msra.mxu0 0.0
  %8888 = vmatprep.subr.mxu0 0.0
  %8889 = vmatpush1.msra.mxu0 0.0
  %8890 = vmatprep.subr.mxu0 0.0
  %8891 = vmatpush1.msra.mxu0 0.0
  %8892 = vmatprep.subr.mxu0 0.0
  %8893 = vmatpush1.msra.mxu0 0.0
  %8894 = vmatprep.subr.mxu0 0.0
  %8895 = vmatpush1.msra.mxu0 0.0
  %8896 = vmatprep.subr.mxu0 0.0
  %8897 = vmatpush1.msra.mxu0 0.0
  %8898 = vmatprep.subr.mxu0 0.0
  %8899 = vmatpush1.msra.mxu0 0.0
  %8900 = vmatprep.subr.mxu0 0.0
  %8901 = vmatpush1.msra.mxu0 %v8868
  %8902 = vmatprep.subr.mxu0 0.0
  %8903 = vmatpush2.msra.mxu0 0.0
  %8904 = vmatprep.subr.mxu0 0.0
  %8905 = vmatpush2.msra.mxu0 0.0
  %8906 = vmatprep.subr.mxu0 0.0
  %8907 = vmatpush2.msra.mxu0 0.0
  %8908 = vmatprep.subr.mxu0 0.0
  %8909 = vmatpush2.msra.mxu0 0.0
  %8910 = vmatprep.subr.mxu0 0.0
  %8911 = vmatpush2.msra.mxu0 0.0
  %8912 = vmatprep.subr.mxu0 0.0
  %8913 = vmatpush2.msra.mxu0 0.0
  %8914 = vmatprep.subr.mxu0 0.0
  %8915 = vmatpush2.msra.mxu0 0.0
  %8916 = vmatprep.subr.mxu0 0.0
  %8917 = vmatpush2.msra.mxu0 0.0
  %8918 = vmatprep.subr.mxu0 0.0
  %8919 = vmatpush2.msra.mxu0 0.0
  %8920 = vmatprep.subr.mxu0 0.0
  %8921 = vmatpush2.msra.mxu0 0.0
  %8922 = vmatprep.subr.mxu0 0.0
  %8923 = vmatpush2.msra.mxu0 0.0
  %8924 = vmatprep.subr.mxu0 0.0
  %8925 = vmatpush2.msra.mxu0 0.0
  %8926 = vmatprep.subr.mxu0 0.0
  %8927 = vmatpush2.msra.mxu0 0.0
  %8928 = vmatprep.subr.mxu0 0.0
  %8929 = vmatpush2.msra.mxu0 0.0
  %8930 = vmatprep.subr.mxu0 0.0
  %8931 = vmatpush2.msra.mxu0 0.0
  %8932 = vmatprep.subr.mxu0 0.0
  %8933 = vmatpush2.msra.mxu0 0.0
  %8934 = vmatprep.mubr.f32.mxu0 0.0
  %8935 = vmatmul.mubr.f32.gmra.mxu0 %v8676
  %v8936 = vpop.f32.mrf.mxu0
  %v8937 = vadd.f32 0.0, %v8936
  %v8938 = vpop.f32.mrf.mxu0
  %8939 = vmatprep.mubr.f32.mxu0 0.0
  %8940 = vmatmul.mubr.f32.gmra.mxu0 %v8679
  %v8941 = vpop.f32.mrf.mxu0
  %v8942 = vadd.f32 0.0, %v8941
  %v8943 = vpop.f32.mrf.mxu0
  %8944 = vmatprep.mubr.f32.mxu0 0.0
  %8945 = vmatmul.mubr.f32.gmra.mxu0 %v8682
  %v8946 = vpop.f32.mrf.mxu0
  %v8947 = vadd.f32 0.0, %v8946
  %v8948 = vpop.f32.mrf.mxu0
  %8949 = vmatprep.mubr.f32.mxu0 0.0
  %8950 = vmatmul.mubr.f32.gmra.mxu0 %v8685
  %v8951 = vpop.f32.mrf.mxu0
  %v8952 = vadd.f32 0.0, %v8951
  %v8953 = vpop.f32.mrf.mxu0
  %8954 = vmatprep.mubr.f32.mxu0 0.0
  %8955 = vmatmul.mubr.f32.gmra.mxu0 %v8688
  %v8956 = vpop.f32.mrf.mxu0
  %v8957 = vadd.f32 0.0, %v8956
  %v8958 = vpop.f32.mrf.mxu0
  %8959 = vmatprep.mubr.f32.mxu0 0.0
  %8960 = vmatmul.mubr.f32.gmra.mxu0 %v8691
  %v8961 = vpop.f32.mrf.mxu0
  %v8962 = vadd.f32 0.0, %v8961
  %v8963 = vpop.f32.mrf.mxu0
  %8964 = vmatprep.mubr.f32.mxu0 0.0
  %8965 = vmatmul.mubr.f32.gmra.mxu0 %v8694
  %v8966 = vpop.f32.mrf.mxu0
  %v8967 = vadd.f32 0.0, %v8966
  %v8968 = vpop.f32.mrf.mxu0
  %8969 = vmatprep.mubr.f32.mxu0 0.0
  %8970 = vmatmul.mubr.f32.gmra.mxu0 %v8697
  %v8971 = vpop.f32.mrf.mxu0
  %v8972 = vadd.f32 0.0, %v8971
  %v8973 = vpop.f32.mrf.mxu0
  %8974 = vmatprep.mubr.f32.mxu0 0.0
  %8975 = vmatmul.mubr.f32.gmra.mxu0 %v8700
  %v8976 = vpop.f32.mrf.mxu0
  %v8977 = vadd.f32 0.0, %v8976
  %v8978 = vpop.f32.mrf.mxu0
  %8979 = vmatprep.mubr.f32.mxu0 0.0
  %8980 = vmatmul.mubr.f32.gmra.mxu0 %v8703
  %v8981 = vpop.f32.mrf.mxu0
  %v8982 = vadd.f32 0.0, %v8981
  %v8983 = vpop.f32.mrf.mxu0
  %8984 = vmatprep.mubr.f32.mxu0 0.0
  %8985 = vmatmul.mubr.f32.gmra.mxu0 %v8706
  %v8986 = vpop.f32.mrf.mxu0
  %v8987 = vadd.f32 0.0, %v8986
  %v8988 = vpop.f32.mrf.mxu0
  %8989 = vmatprep.mubr.f32.mxu0 0.0
  %8990 = vmatmul.mubr.f32.gmra.mxu0 %v8709
  %v8991 = vpop.f32.mrf.mxu0
  %v8992 = vadd.f32 0.0, %v8991
  %v8993 = vpop.f32.mrf.mxu0
  %8994 = vmatprep.mubr.f32.mxu0 0.0
  %8995 = vmatmul.mubr.f32.gmra.mxu0 %v8712
  %v8996 = vpop.f32.mrf.mxu0
  %v8997 = vadd.f32 0.0, %v8996
  %v8998 = vpop.f32.mrf.mxu0
  %8999 = vmatprep.mubr.f32.mxu0 0.0
  %9000 = vmatmul.mubr.f32.gmra.mxu0 %v8715
  %v9001 = vpop.f32.mrf.mxu0
  %v9002 = vadd.f32 0.0, %v9001
  %v9003 = vpop.f32.mrf.mxu0
  %9004 = vmatprep.mubr.f32.mxu0 0.0
  %9005 = vmatmul.mubr.f32.gmra.mxu0 %v8718
  %v9006 = vpop.f32.mrf.mxu0
  %v9007 = vadd.f32 0.0, %v9006
  %v9008 = vpop.f32.mrf.mxu0
  %9009 = vmatprep.mubr.f32.mxu0 0.0
  %9010 = vmatmul.mubr.f32.gmra.mxu0 %v8721
  %v9011 = vpop.f32.mrf.mxu0
  %v9012 = vadd.f32 0.0, %v9011
  %v9013 = vpop.f32.mrf.mxu0
  %9014 = vmatprep.mubr.f32.mxu0 0.0
  %9015 = vmatmul.mubr.f32.gmra.mxu0 %v8724
  %v9016 = vpop.f32.mrf.mxu0
  %v9017 = vadd.f32 0.0, %v9016
  %v9018 = vpop.f32.mrf.mxu0
  %9019 = vmatprep.mubr.f32.mxu0 0.0
  %9020 = vmatmul.mubr.f32.gmra.mxu0 %v8727
  %v9021 = vpop.f32.mrf.mxu0
  %v9022 = vadd.f32 0.0, %v9021
  %v9023 = vpop.f32.mrf.mxu0
  %9024 = vmatprep.mubr.f32.mxu0 0.0
  %9025 = vmatmul.mubr.f32.gmra.mxu0 %v8730
  %v9026 = vpop.f32.mrf.mxu0
  %v9027 = vadd.f32 0.0, %v9026
  %v9028 = vpop.f32.mrf.mxu0
  %9029 = vmatprep.mubr.f32.mxu0 0.0
  %9030 = vmatmul.mubr.f32.gmra.mxu0 %v8733
  %v9031 = vpop.f32.mrf.mxu0
  %v9032 = vadd.f32 0.0, %v9031
  %v9033 = vpop.f32.mrf.mxu0
  %9034 = vmatprep.mubr.f32.mxu0 0.0
  %9035 = vmatmul.mubr.f32.gmra.mxu0 %v8736
  %v9036 = vpop.f32.mrf.mxu0
  %v9037 = vadd.f32 0.0, %v9036
  %v9038 = vpop.f32.mrf.mxu0
  %9039 = vmatprep.mubr.f32.mxu0 0.0
  %9040 = vmatmul.mubr.f32.gmra.mxu0 %v8739
  %v9041 = vpop.f32.mrf.mxu0
  %v9042 = vadd.f32 0.0, %v9041
  %v9043 = vpop.f32.mrf.mxu0
  %9044 = vmatprep.mubr.f32.mxu0 0.0
  %9045 = vmatmul.mubr.f32.gmra.mxu0 %v8742
  %v9046 = vpop.f32.mrf.mxu0
  %v9047 = vadd.f32 0.0, %v9046
  %v9048 = vpop.f32.mrf.mxu0
  %9049 = vmatprep.mubr.f32.mxu0 0.0
  %9050 = vmatmul.mubr.f32.gmra.mxu0 %v8745
  %v9051 = vpop.f32.mrf.mxu0
  %v9052 = vadd.f32 0.0, %v9051
  %v9053 = vpop.f32.mrf.mxu0
  %9054 = vmatprep.mubr.f32.mxu0 0.0
  %9055 = vmatmul.mubr.f32.gmra.mxu0 %v8748
  %v9056 = vpop.f32.mrf.mxu0
  %v9057 = vadd.f32 0.0, %v9056
  %v9058 = vpop.f32.mrf.mxu0
  %9059 = vmatprep.mubr.f32.mxu0 0.0
  %9060 = vmatmul.mubr.f32.gmra.mxu0 %v8751
  %v9061 = vpop.f32.mrf.mxu0
  %v9062 = vadd.f32 0.0, %v9061
  %v9063 = vpop.f32.mrf.mxu0
  %9064 = vmatprep.mubr.f32.mxu0 0.0
  %9065 = vmatmul.mubr.f32.gmra.mxu0 %v8754
  %v9066 = vpop.f32.mrf.mxu0
  %v9067 = vadd.f32 0.0, %v9066
  %v9068 = vpop.f32.mrf.mxu0
  %9069 = vmatprep.mubr.f32.mxu0 0.0
  %9070 = vmatmul.mubr.f32.gmra.mxu0 %v8757
  %v9071 = vpop.f32.mrf.mxu0
  %v9072 = vadd.f32 0.0, %v9071
  %v9073 = vpop.f32.mrf.mxu0
  %9074 = vmatprep.mubr.f32.mxu0 0.0
  %9075 = vmatmul.mubr.f32.gmra.mxu0 %v8760
  %v9076 = vpop.f32.mrf.mxu0
  %v9077 = vadd.f32 0.0, %v9076
  %v9078 = vpop.f32.mrf.mxu0
  %9079 = vmatprep.mubr.f32.mxu0 0.0
  %9080 = vmatmul.mubr.f32.gmra.mxu0 %v8763
  %v9081 = vpop.f32.mrf.mxu0
  %v9082 = vadd.f32 0.0, %v9081
  %v9083 = vpop.f32.mrf.mxu0
  %9084 = vmatprep.mubr.f32.mxu0 0.0
  %9085 = vmatmul.mubr.f32.gmra.mxu0 %v8766
  %v9086 = vpop.f32.mrf.mxu0
  %v9087 = vadd.f32 0.0, %v9086
  %v9088 = vpop.f32.mrf.mxu0
  %9089 = vmatprep.mubr.f32.mxu0 0.0
  %9090 = vmatmul.mubr.f32.gmra.mxu0 %v8769
  %v9091 = vpop.f32.mrf.mxu0
  %v9092 = vadd.f32 0.0, %v9091
  %v9093 = vpop.f32.mrf.mxu0
  %9094 = vmatprep.mubr.f32.mxu0 0.0
  %9095 = vmatmul.mubr.f32.gmra.mxu0 %v8772
  %v9096 = vpop.f32.mrf.mxu0
  %v9097 = vadd.f32 0.0, %v9096
  %v9098 = vpop.f32.mrf.mxu0
  %9099 = vmatprep.mubr.f32.mxu0 0.0
  %9100 = vmatmul.mubr.f32.gmra.mxu0 %v8775
  %v9101 = vpop.f32.mrf.mxu0
  %v9102 = vadd.f32 0.0, %v9101
  %v9103 = vpop.f32.mrf.mxu0
  %9104 = vmatprep.mubr.f32.mxu0 0.0
  %9105 = vmatmul.mubr.f32.gmra.mxu0 %v8778
  %v9106 = vpop.f32.mrf.mxu0
  %v9107 = vadd.f32 0.0, %v9106
  %v9108 = vpop.f32.mrf.mxu0
  %9109 = vmatprep.mubr.f32.mxu0 0.0
  %9110 = vmatmul.mubr.f32.gmra.mxu0 %v8781
  %v9111 = vpop.f32.mrf.mxu0
  %v9112 = vadd.f32 0.0, %v9111
  %v9113 = vpop.f32.mrf.mxu0
  %9114 = vmatprep.mubr.f32.mxu0 0.0
  %9115 = vmatmul.mubr.f32.gmra.mxu0 %v8784
  %v9116 = vpop.f32.mrf.mxu0
  %v9117 = vadd.f32 0.0, %v9116
  %v9118 = vpop.f32.mrf.mxu0
  %9119 = vmatprep.mubr.f32.mxu0 0.0
  %9120 = vmatmul.mubr.f32.gmra.mxu0 %v8787
  %v9121 = vpop.f32.mrf.mxu0
  %v9122 = vadd.f32 0.0, %v9121
  %v9123 = vpop.f32.mrf.mxu0
  %9124 = vmatprep.mubr.f32.mxu0 0.0
  %9125 = vmatmul.mubr.f32.gmra.mxu0 %v8790
  %v9126 = vpop.f32.mrf.mxu0
  %v9127 = vadd.f32 0.0, %v9126
  %v9128 = vpop.f32.mrf.mxu0
  %9129 = vmatprep.mubr.f32.mxu0 0.0
  %9130 = vmatmul.mubr.f32.gmra.mxu0 %v8793
  %v9131 = vpop.f32.mrf.mxu0
  %v9132 = vadd.f32 0.0, %v9131
  %v9133 = vpop.f32.mrf.mxu0
  %9134 = vmatprep.mubr.f32.mxu0 0.0
  %9135 = vmatmul.mubr.f32.gmra.mxu0 %v8796
  %v9136 = vpop.f32.mrf.mxu0
  %v9137 = vadd.f32 0.0, %v9136
  %v9138 = vpop.f32.mrf.mxu0
  %9139 = vmatprep.mubr.f32.mxu0 0.0
  %9140 = vmatmul.mubr.f32.gmra.mxu0 %v8799
  %v9141 = vpop.f32.mrf.mxu0
  %v9142 = vadd.f32 0.0, %v9141
  %v9143 = vpop.f32.mrf.mxu0
  %9144 = vmatprep.mubr.f32.mxu0 0.0
  %9145 = vmatmul.mubr.f32.gmra.mxu0 %v8802
  %v9146 = vpop.f32.mrf.mxu0
  %v9147 = vadd.f32 0.0, %v9146
  %v9148 = vpop.f32.mrf.mxu0
  %9149 = vmatprep.mubr.f32.mxu0 0.0
  %9150 = vmatmul.mubr.f32.gmra.mxu0 %v8805
  %v9151 = vpop.f32.mrf.mxu0
  %v9152 = vadd.f32 0.0, %v9151
  %v9153 = vpop.f32.mrf.mxu0
  %9154 = vmatprep.mubr.f32.mxu0 0.0
  %9155 = vmatmul.mubr.f32.gmra.mxu0 %v8808
  %v9156 = vpop.f32.mrf.mxu0
  %v9157 = vadd.f32 0.0, %v9156
  %v9158 = vpop.f32.mrf.mxu0
  %9159 = vmatprep.mubr.f32.mxu0 0.0
  %9160 = vmatmul.mubr.f32.gmra.mxu0 %v8811
  %v9161 = vpop.f32.mrf.mxu0
  %v9162 = vadd.f32 0.0, %v9161
  %v9163 = vpop.f32.mrf.mxu0
  %9164 = vmatprep.mubr.f32.mxu0 0.0
  %9165 = vmatmul.mubr.f32.gmra.mxu0 %v8814
  %v9166 = vpop.f32.mrf.mxu0
  %v9167 = vadd.f32 0.0, %v9166
  %v9168 = vpop.f32.mrf.mxu0
  %9169 = vmatprep.mubr.f32.mxu0 0.0
  %9170 = vmatmul.mubr.f32.gmra.mxu0 %v8817
  %v9171 = vpop.f32.mrf.mxu0
  %v9172 = vadd.f32 0.0, %v9171
  %v9173 = vpop.f32.mrf.mxu0
  %9174 = vmatprep.mubr.f32.mxu0 0.0
  %9175 = vmatmul.mubr.f32.gmra.mxu0 %v8820
  %v9176 = vpop.f32.mrf.mxu0
  %v9177 = vadd.f32 0.0, %v9176
  %v9178 = vpop.f32.mrf.mxu0
  %9179 = vmatprep.mubr.f32.mxu0 0.0
  %9180 = vmatmul.mubr.f32.gmra.mxu0 %v8823
  %v9181 = vpop.f32.mrf.mxu0
  %v9182 = vadd.f32 0.0, %v9181
  %v9183 = vpop.f32.mrf.mxu0
  %9184 = vmatprep.mubr.f32.mxu0 0.0
  %9185 = vmatmul.mubr.f32.gmra.mxu0 %v8826
  %v9186 = vpop.f32.mrf.mxu0
  %v9187 = vadd.f32 0.0, %v9186
  %v9188 = vpop.f32.mrf.mxu0
  %9189 = vmatprep.mubr.f32.mxu0 0.0
  %9190 = vmatmul.mubr.f32.gmra.mxu0 %v8829
  %v9191 = vpop.f32.mrf.mxu0
  %v9192 = vadd.f32 0.0, %v9191
  %v9193 = vpop.f32.mrf.mxu0
  %9194 = vmatprep.mubr.f32.mxu0 0.0
  %9195 = vmatmul.mubr.f32.gmra.mxu0 %v8832
  %v9196 = vpop.f32.mrf.mxu0
  %v9197 = vadd.f32 0.0, %v9196
  %v9198 = vpop.f32.mrf.mxu0
  %9199 = vmatprep.mubr.f32.mxu0 0.0
  %9200 = vmatmul.mubr.f32.gmra.mxu0 %v8835
  %v9201 = vpop.f32.mrf.mxu0
  %v9202 = vadd.f32 0.0, %v9201
  %v9203 = vpop.f32.mrf.mxu0
  %9204 = vmatprep.mubr.f32.mxu0 0.0
  %9205 = vmatmul.mubr.f32.gmra.mxu0 %v8838
  %v9206 = vpop.f32.mrf.mxu0
  %v9207 = vadd.f32 0.0, %v9206
  %v9208 = vpop.f32.mrf.mxu0
  %9209 = vmatprep.mubr.f32.mxu0 0.0
  %9210 = vmatmul.mubr.f32.gmra.mxu0 %v8841
  %v9211 = vpop.f32.mrf.mxu0
  %v9212 = vadd.f32 0.0, %v9211
  %v9213 = vpop.f32.mrf.mxu0
  %9214 = vmatprep.mubr.f32.mxu0 0.0
  %9215 = vmatmul.mubr.f32.gmra.mxu0 %v8844
  %v9216 = vpop.f32.mrf.mxu0
  %v9217 = vadd.f32 0.0, %v9216
  %v9218 = vpop.f32.mrf.mxu0
  %9219 = vmatprep.mubr.f32.mxu0 0.0
  %9220 = vmatmul.mubr.f32.gmra.mxu0 %v8847
  %v9221 = vpop.f32.mrf.mxu0
  %v9222 = vadd.f32 0.0, %v9221
  %v9223 = vpop.f32.mrf.mxu0
  %9224 = vmatprep.mubr.f32.mxu0 0.0
  %9225 = vmatmul.mubr.f32.gmra.mxu0 %v8850
  %v9226 = vpop.f32.mrf.mxu0
  %v9227 = vadd.f32 0.0, %v9226
  %v9228 = vpop.f32.mrf.mxu0
  %9229 = vmatprep.mubr.f32.mxu0 0.0
  %9230 = vmatmul.mubr.f32.gmra.mxu0 %v8853
  %v9231 = vpop.f32.mrf.mxu0
  %v9232 = vadd.f32 0.0, %v9231
  %v9233 = vpop.f32.mrf.mxu0
  %9234 = vmatprep.mubr.f32.mxu0 0.0
  %9235 = vmatmul.mubr.f32.gmra.mxu0 %v8856
  %v9236 = vpop.f32.mrf.mxu0
  %v9237 = vadd.f32 0.0, %v9236
  %v9238 = vpop.f32.mrf.mxu0
  %9239 = vmatprep.mubr.f32.mxu0 0.0
  %9240 = vmatmul.mubr.f32.gmra.mxu0 %v8859
  %v9241 = vpop.f32.mrf.mxu0
  %v9242 = vadd.f32 0.0, %v9241
  %v9243 = vpop.f32.mrf.mxu0
  %9244 = vmatprep.mubr.f32.mxu0 0.0
  %9245 = vmatmul.mubr.f32.gmra.mxu0 %v8862
  %v9246 = vpop.f32.mrf.mxu0
  %v9247 = vadd.f32 0.0, %v9246
  %v9248 = vpop.f32.mrf.mxu0
  %9249 = vmatprep.mubr.f32.mxu0 0.0
  %9250 = vmatmul.mubr.f32.gmra.mxu0 %v8865
  %v9251 = vpop.f32.mrf.mxu0
  %v9252 = vadd.f32 0.0, %v9251
  %v9253 = vpop.f32.mrf.mxu0
  %9254 = vdwg.mxu0
  %v9255 = vadd.f32 %v8291, %v8937
  %v9256 = vadd.f32 %v8296, %v8942
  %v9257 = vadd.f32 %v8301, %v8947
  %v9258 = vadd.f32 %v8306, %v8952
  %v9259 = vadd.f32 %v8311, %v8957
  %v9260 = vadd.f32 %v8316, %v8962
  %v9261 = vadd.f32 %v8321, %v8967
  %v9262 = vadd.f32 %v8326, %v8972
  %v9263 = vadd.f32 %v8331, %v8977
  %v9264 = vadd.f32 %v8336, %v8982
  %v9265 = vadd.f32 %v8341, %v8987
  %v9266 = vadd.f32 %v8346, %v8992
  %v9267 = vadd.f32 %v8351, %v8997
  %v9268 = vadd.f32 %v8356, %v9002
  %v9269 = vadd.f32 %v8361, %v9007
  %v9270 = vadd.f32 %v8366, %v9012
  %v9271 = vadd.f32 %v8371, %v9017
  %v9272 = vadd.f32 %v8376, %v9022
  %v9273 = vadd.f32 %v8381, %v9027
  %v9274 = vadd.f32 %v8386, %v9032
  %v9275 = vadd.f32 %v8391, %v9037
  %v9276 = vadd.f32 %v8396, %v9042
  %v9277 = vadd.f32 %v8401, %v9047
  %v9278 = vadd.f32 %v8406, %v9052
  %v9279 = vadd.f32 %v8411, %v9057
  %v9280 = vadd.f32 %v8416, %v9062
  %v9281 = vadd.f32 %v8421, %v9067
  %v9282 = vadd.f32 %v8426, %v9072
  %v9283 = vadd.f32 %v8431, %v9077
  %v9284 = vadd.f32 %v8436, %v9082
  %v9285 = vadd.f32 %v8441, %v9087
  %v9286 = vadd.f32 %v8446, %v9092
  %v9287 = vadd.f32 %v8451, %v9097
  %v9288 = vadd.f32 %v8456, %v9102
  %v9289 = vadd.f32 %v8461, %v9107
  %v9290 = vadd.f32 %v8466, %v9112
  %v9291 = vadd.f32 %v8471, %v9117
  %v9292 = vadd.f32 %v8476, %v9122
  %v9293 = vadd.f32 %v8481, %v9127
  %v9294 = vadd.f32 %v8486, %v9132
  %v9295 = vadd.f32 %v8491, %v9137
  %v9296 = vadd.f32 %v8496, %v9142
  %v9297 = vadd.f32 %v8501, %v9147
  %v9298 = vadd.f32 %v8506, %v9152
  %v9299 = vadd.f32 %v8511, %v9157
  %v9300 = vadd.f32 %v8516, %v9162
  %v9301 = vadd.f32 %v8521, %v9167
  %v9302 = vadd.f32 %v8526, %v9172
  %v9303 = vadd.f32 %v8531, %v9177
  %v9304 = vadd.f32 %v8536, %v9182
  %v9305 = vadd.f32 %v8541, %v9187
  %v9306 = vadd.f32 %v8546, %v9192
  %v9307 = vadd.f32 %v8551, %v9197
  %v9308 = vadd.f32 %v8556, %v9202
  %v9309 = vadd.f32 %v8561, %v9207
  %v9310 = vadd.f32 %v8566, %v9212
  %v9311 = vadd.f32 %v8571, %v9217
  %v9312 = vadd.f32 %v8576, %v9222
  %v9313 = vadd.f32 %v8581, %v9227
  %v9314 = vadd.f32 %v8586, %v9232
  %v9315 = vadd.f32 %v8591, %v9237
  %v9316 = vadd.f32 %v8596, %v9242
  %v9317 = vadd.f32 %v8601, %v9247
  %v9318 = vadd.f32 %v8606, %v9252
  %v9319 = vld [vmem:[%s78] sm:$0xff]
  %v9320 = vld [vmem:[%s78 + $0x8] sm:$0xff]
  %v9321 = vld [vmem:[%s78 + $0x18] sm:$0xff]
  %v9322 = vld [vmem:[%s78 + $0x20] sm:$0xff]
  %v9323 = vld [vmem:[%s78 + $0x30] sm:$0xff]
  %v9324 = vld [vmem:[%s78 + $0x38] sm:$0xff]
  %v9325 = vld [vmem:[%s78 + $0x48] sm:$0xff]
  %v9326 = vld [vmem:[%s78 + $0x50] sm:$0xff]
  %v9327 = vld [vmem:[%s78 + $0x60] sm:$0xff]
  %v9328 = vld [vmem:[%s78 + $0x68] sm:$0xff]
  %v9329 = vld [vmem:[%s78 + $0x78] sm:$0xff]
  %v9330 = vld [vmem:[%s78 + $0x80] sm:$0xff]
  %v9331 = vld [vmem:[%s78 + $0x90] sm:$0xff]
  %v9332 = vld [vmem:[%s78 + $0x98] sm:$0xff]
  %v9333 = vld [vmem:[%s78 + $0xa8] sm:$0xff]
  %v9334 = vld [vmem:[%s78 + $0xb0] sm:$0xff]
  %v9335 = vld [vmem:[%s78 + $0xc0] sm:$0xff]
  %v9336 = vld [vmem:[%s78 + $0xc8] sm:$0xff]
  %v9337 = vld [vmem:[%s78 + $0xd8] sm:$0xff]
  %v9338 = vld [vmem:[%s78 + $0xe0] sm:$0xff]
  %v9339 = vld [vmem:[%s78 + $0xf0] sm:$0xff]
  %v9340 = vld [vmem:[%s78 + $0xf8] sm:$0xff]
  %v9341 = vld [vmem:[%s78 + $0x108] sm:$0xff]
  %v9342 = vld [vmem:[%s78 + $0x110] sm:$0xff]
  %v9343 = vld [vmem:[%s78 + $0x120] sm:$0xff]
  %v9344 = vld [vmem:[%s78 + $0x128] sm:$0xff]
  %v9345 = vld [vmem:[%s78 + $0x138] sm:$0xff]
  %v9346 = vld [vmem:[%s78 + $0x140] sm:$0xff]
  %v9347 = vld [vmem:[%s78 + $0x150] sm:$0xff]
  %v9348 = vld [vmem:[%s78 + $0x158] sm:$0xff]
  %v9349 = vld [vmem:[%s78 + $0x168] sm:$0xff]
  %v9350 = vld [vmem:[%s78 + $0x170] sm:$0xff]
  %v9351 = vld [vmem:[%s78 + $0x1b0] sm:$0xff]
  %v9352 = vld [vmem:[%s78 + $0x1b8] sm:$0xff]
  %v9353 = vld [vmem:[%s78 + $0x1c8] sm:$0xff]
  %v9354 = vld [vmem:[%s78 + $0x1d0] sm:$0xff]
  %v9355 = vld [vmem:[%s78 + $0x1e0] sm:$0xff]
  %v9356 = vld [vmem:[%s78 + $0x1e8] sm:$0xff]
  %v9357 = vld [vmem:[%s78 + $0x1f8] sm:$0xff]
  %v9358 = vld [vmem:[%s78 + $0x200] sm:$0xff]
  %v9359 = vld [vmem:[%s78 + $0x210] sm:$0xff]
  %v9360 = vld [vmem:[%s78 + $0x218] sm:$0xff]
  %v9361 = vld [vmem:[%s78 + $0x228] sm:$0xff]
  %v9362 = vld [vmem:[%s78 + $0x230] sm:$0xff]
  %v9363 = vld [vmem:[%s78 + $0x240] sm:$0xff]
  %v9364 = vld [vmem:[%s78 + $0x248] sm:$0xff]
  %v9365 = vld [vmem:[%s78 + $0x258] sm:$0xff]
  %v9366 = vld [vmem:[%s78 + $0x260] sm:$0xff]
  %v9367 = vld [vmem:[%s78 + $0x270] sm:$0xff]
  %v9368 = vld [vmem:[%s78 + $0x278] sm:$0xff]
  %v9369 = vld [vmem:[%s78 + $0x288] sm:$0xff]
  %v9370 = vld [vmem:[%s78 + $0x290] sm:$0xff]
  %v9371 = vld [vmem:[%s78 + $0x2a0] sm:$0xff]
  %v9372 = vld [vmem:[%s78 + $0x2a8] sm:$0xff]
  %v9373 = vld [vmem:[%s78 + $0x2b8] sm:$0xff]
  %v9374 = vld [vmem:[%s78 + $0x2c0] sm:$0xff]
  %v9375 = vld [vmem:[%s78 + $0x2d0] sm:$0xff]
  %v9376 = vld [vmem:[%s78 + $0x2d8] sm:$0xff]
  %v9377 = vld [vmem:[%s78 + $0x2e8] sm:$0xff]
  %v9378 = vld [vmem:[%s78 + $0x2f0] sm:$0xff]
  %v9379 = vld [vmem:[%s78 + $0x300] sm:$0xff]
  %v9380 = vld [vmem:[%s78 + $0x308] sm:$0xff]
  %v9381 = vld [vmem:[%s78 + $0x318] sm:$0xff]
  %v9382 = vld [vmem:[%s78 + $0x320] sm:$0xff]
  %s9383 = scalar_lea.vmem %s2, 12
  %v9384 = vld [vmem:[%s9383] sm:$0xf]
  %v9386 = vsel %vm79, %v9319, 0
  %v9389 = vsel %vm79, %v9320, 0
  %v9392 = vsel %vm79, %v9321, 0
  %v9395 = vsel %vm79, %v9322, 0
  %v9398 = vsel %vm79, %v9323, 0
  %v9401 = vsel %vm79, %v9324, 0
  %v9404 = vsel %vm79, %v9325, 0
  %v9407 = vsel %vm79, %v9326, 0
  %v9410 = vsel %vm79, %v9327, 0
  %v9413 = vsel %vm79, %v9328, 0
  %v9416 = vsel %vm79, %v9329, 0
  %v9419 = vsel %vm79, %v9330, 0
  %v9422 = vsel %vm79, %v9331, 0
  %v9425 = vsel %vm79, %v9332, 0
  %v9428 = vsel %vm79, %v9333, 0
  %v9431 = vsel %vm79, %v9334, 0
  %v9434 = vsel %vm79, %v9335, 0
  %v9437 = vsel %vm79, %v9336, 0
  %v9440 = vsel %vm79, %v9337, 0
  %v9443 = vsel %vm79, %v9338, 0
  %v9446 = vsel %vm79, %v9339, 0
  %v9449 = vsel %vm79, %v9340, 0
  %v9452 = vsel %vm79, %v9341, 0
  %v9455 = vsel %vm79, %v9342, 0
  %v9458 = vsel %vm79, %v9343, 0
  %v9461 = vsel %vm79, %v9344, 0
  %v9464 = vsel %vm79, %v9345, 0
  %v9467 = vsel %vm79, %v9346, 0
  %v9470 = vsel %vm79, %v9347, 0
  %v9473 = vsel %vm79, %v9348, 0
  %v9476 = vsel %vm79, %v9349, 0
  %v9479 = vsel %vm79, %v9350, 0
  %v9482 = vsel %vm79, %v9351, 0
  %v9485 = vsel %vm79, %v9352, 0
  %v9488 = vsel %vm79, %v9353, 0
  %v9491 = vsel %vm79, %v9354, 0
  %v9494 = vsel %vm79, %v9355, 0
  %v9497 = vsel %vm79, %v9356, 0
  %v9500 = vsel %vm79, %v9357, 0
  %v9503 = vsel %vm79, %v9358, 0
  %v9506 = vsel %vm79, %v9359, 0
  %v9509 = vsel %vm79, %v9360, 0
  %v9512 = vsel %vm79, %v9361, 0
  %v9515 = vsel %vm79, %v9362, 0
  %v9518 = vsel %vm79, %v9363, 0
  %v9521 = vsel %vm79, %v9364, 0
  %v9524 = vsel %vm79, %v9365, 0
  %v9527 = vsel %vm79, %v9366, 0
  %v9530 = vsel %vm79, %v9367, 0
  %v9533 = vsel %vm79, %v9368, 0
  %v9536 = vsel %vm79, %v9369, 0
  %v9539 = vsel %vm79, %v9370, 0
  %v9542 = vsel %vm79, %v9371, 0
  %v9545 = vsel %vm79, %v9372, 0
  %v9548 = vsel %vm79, %v9373, 0
  %v9551 = vsel %vm79, %v9374, 0
  %v9554 = vsel %vm79, %v9375, 0
  %v9557 = vsel %vm79, %v9376, 0
  %v9560 = vsel %vm79, %v9377, 0
  %v9563 = vsel %vm79, %v9378, 0
  %v9566 = vsel %vm79, %v9379, 0
  %v9569 = vsel %vm79, %v9380, 0
  %v9572 = vsel %vm79, %v9381, 0
  %v9575 = vsel %vm79, %v9382, 0
  %v9578 = vsel %vm621, %v9384, 0
  %9580 = vmatprep.subr.mxu0 0.0
  %9581 = vmatpush1.msra.mxu0 0.0
  %9582 = vmatprep.subr.mxu0 0.0
  %9583 = vmatpush1.msra.mxu0 0.0
  %9584 = vmatprep.subr.mxu0 0.0
  %9585 = vmatpush1.msra.mxu0 0.0
  %9586 = vmatprep.subr.mxu0 0.0
  %9587 = vmatpush1.msra.mxu0 0.0
  %9588 = vmatprep.subr.mxu0 0.0
  %9589 = vmatpush1.msra.mxu0 0.0
  %9590 = vmatprep.subr.mxu0 0.0
  %9591 = vmatpush1.msra.mxu0 0.0
  %9592 = vmatprep.subr.mxu0 0.0
  %9593 = vmatpush1.msra.mxu0 0.0
  %9594 = vmatprep.subr.mxu0 0.0
  %9595 = vmatpush1.msra.mxu0 0.0
  %9596 = vmatprep.subr.mxu0 0.0
  %9597 = vmatpush1.msra.mxu0 0.0
  %9598 = vmatprep.subr.mxu0 0.0
  %9599 = vmatpush1.msra.mxu0 0.0
  %9600 = vmatprep.subr.mxu0 0.0
  %9601 = vmatpush1.msra.mxu0 0.0
  %9602 = vmatprep.subr.mxu0 0.0
  %9603 = vmatpush1.msra.mxu0 0.0
  %9604 = vmatprep.subr.mxu0 0.0
  %9605 = vmatpush1.msra.mxu0 0.0
  %9606 = vmatprep.subr.mxu0 0.0
  %9607 = vmatpush1.msra.mxu0 0.0
  %9608 = vmatprep.subr.mxu0 0.0
  %9609 = vmatpush1.msra.mxu0 0.0
  %9610 = vmatprep.subr.mxu0 0.0
  %9611 = vmatpush1.msra.mxu0 %v9578
  %9612 = vmatprep.subr.mxu0 0.0
  %9613 = vmatpush2.msra.mxu0 0.0
  %9614 = vmatprep.subr.mxu0 0.0
  %9615 = vmatpush2.msra.mxu0 0.0
  %9616 = vmatprep.subr.mxu0 0.0
  %9617 = vmatpush2.msra.mxu0 0.0
  %9618 = vmatprep.subr.mxu0 0.0
  %9619 = vmatpush2.msra.mxu0 0.0
  %9620 = vmatprep.subr.mxu0 0.0
  %9621 = vmatpush2.msra.mxu0 0.0
  %9622 = vmatprep.subr.mxu0 0.0
  %9623 = vmatpush2.msra.mxu0 0.0
  %9624 = vmatprep.subr.mxu0 0.0
  %9625 = vmatpush2.msra.mxu0 0.0
  %9626 = vmatprep.subr.mxu0 0.0
  %9627 = vmatpush2.msra.mxu0 0.0
  %9628 = vmatprep.subr.mxu0 0.0
  %9629 = vmatpush2.msra.mxu0 0.0
  %9630 = vmatprep.subr.mxu0 0.0
  %9631 = vmatpush2.msra.mxu0 0.0
  %9632 = vmatprep.subr.mxu0 0.0
  %9633 = vmatpush2.msra.mxu0 0.0
  %9634 = vmatprep.subr.mxu0 0.0
  %9635 = vmatpush2.msra.mxu0 0.0
  %9636 = vmatprep.subr.mxu0 0.0
  %9637 = vmatpush2.msra.mxu0 0.0
  %9638 = vmatprep.subr.mxu0 0.0
  %9639 = vmatpush2.msra.mxu0 0.0
  %9640 = vmatprep.subr.mxu0 0.0
  %9641 = vmatpush2.msra.mxu0 0.0
  %9642 = vmatprep.subr.mxu0 0.0
  %9643 = vmatpush2.msra.mxu0 0.0
  %9644 = vmatprep.mubr.f32.mxu0 0.0
  %9645 = vmatmul.mubr.f32.gmra.mxu0 %v9386
  %v9646 = vpop.f32.mrf.mxu0
  %v9647 = vadd.f32 0.0, %v9646
  %v9648 = vpop.f32.mrf.mxu0
  %9649 = vmatprep.mubr.f32.mxu0 0.0
  %9650 = vmatmul.mubr.f32.gmra.mxu0 %v9389
  %v9651 = vpop.f32.mrf.mxu0
  %v9652 = vadd.f32 0.0, %v9651
  %v9653 = vpop.f32.mrf.mxu0
  %9654 = vmatprep.mubr.f32.mxu0 0.0
  %9655 = vmatmul.mubr.f32.gmra.mxu0 %v9392
  %v9656 = vpop.f32.mrf.mxu0
  %v9657 = vadd.f32 0.0, %v9656
  %v9658 = vpop.f32.mrf.mxu0
  %9659 = vmatprep.mubr.f32.mxu0 0.0
  %9660 = vmatmul.mubr.f32.gmra.mxu0 %v9395
  %v9661 = vpop.f32.mrf.mxu0
  %v9662 = vadd.f32 0.0, %v9661
  %v9663 = vpop.f32.mrf.mxu0
  %9664 = vmatprep.mubr.f32.mxu0 0.0
  %9665 = vmatmul.mubr.f32.gmra.mxu0 %v9398
  %v9666 = vpop.f32.mrf.mxu0
  %v9667 = vadd.f32 0.0, %v9666
  %v9668 = vpop.f32.mrf.mxu0
  %9669 = vmatprep.mubr.f32.mxu0 0.0
  %9670 = vmatmul.mubr.f32.gmra.mxu0 %v9401
  %v9671 = vpop.f32.mrf.mxu0
  %v9672 = vadd.f32 0.0, %v9671
  %v9673 = vpop.f32.mrf.mxu0
  %9674 = vmatprep.mubr.f32.mxu0 0.0
  %9675 = vmatmul.mubr.f32.gmra.mxu0 %v9404
  %v9676 = vpop.f32.mrf.mxu0
  %v9677 = vadd.f32 0.0, %v9676
  %v9678 = vpop.f32.mrf.mxu0
  %9679 = vmatprep.mubr.f32.mxu0 0.0
  %9680 = vmatmul.mubr.f32.gmra.mxu0 %v9407
  %v9681 = vpop.f32.mrf.mxu0
  %v9682 = vadd.f32 0.0, %v9681
  %v9683 = vpop.f32.mrf.mxu0
  %9684 = vmatprep.mubr.f32.mxu0 0.0
  %9685 = vmatmul.mubr.f32.gmra.mxu0 %v9410
  %v9686 = vpop.f32.mrf.mxu0
  %v9687 = vadd.f32 0.0, %v9686
  %v9688 = vpop.f32.mrf.mxu0
  %9689 = vmatprep.mubr.f32.mxu0 0.0
  %9690 = vmatmul.mubr.f32.gmra.mxu0 %v9413
  %v9691 = vpop.f32.mrf.mxu0
  %v9692 = vadd.f32 0.0, %v9691
  %v9693 = vpop.f32.mrf.mxu0
  %9694 = vmatprep.mubr.f32.mxu0 0.0
  %9695 = vmatmul.mubr.f32.gmra.mxu0 %v9416
  %v9696 = vpop.f32.mrf.mxu0
  %v9697 = vadd.f32 0.0, %v9696
  %v9698 = vpop.f32.mrf.mxu0
  %9699 = vmatprep.mubr.f32.mxu0 0.0
  %9700 = vmatmul.mubr.f32.gmra.mxu0 %v9419
  %v9701 = vpop.f32.mrf.mxu0
  %v9702 = vadd.f32 0.0, %v9701
  %v9703 = vpop.f32.mrf.mxu0
  %9704 = vmatprep.mubr.f32.mxu0 0.0
  %9705 = vmatmul.mubr.f32.gmra.mxu0 %v9422
  %v9706 = vpop.f32.mrf.mxu0
  %v9707 = vadd.f32 0.0, %v9706
  %v9708 = vpop.f32.mrf.mxu0
  %9709 = vmatprep.mubr.f32.mxu0 0.0
  %9710 = vmatmul.mubr.f32.gmra.mxu0 %v9425
  %v9711 = vpop.f32.mrf.mxu0
  %v9712 = vadd.f32 0.0, %v9711
  %v9713 = vpop.f32.mrf.mxu0
  %9714 = vmatprep.mubr.f32.mxu0 0.0
  %9715 = vmatmul.mubr.f32.gmra.mxu0 %v9428
  %v9716 = vpop.f32.mrf.mxu0
  %v9717 = vadd.f32 0.0, %v9716
  %v9718 = vpop.f32.mrf.mxu0
  %9719 = vmatprep.mubr.f32.mxu0 0.0
  %9720 = vmatmul.mubr.f32.gmra.mxu0 %v9431
  %v9721 = vpop.f32.mrf.mxu0
  %v9722 = vadd.f32 0.0, %v9721
  %v9723 = vpop.f32.mrf.mxu0
  %9724 = vmatprep.mubr.f32.mxu0 0.0
  %9725 = vmatmul.mubr.f32.gmra.mxu0 %v9434
  %v9726 = vpop.f32.mrf.mxu0
  %v9727 = vadd.f32 0.0, %v9726
  %v9728 = vpop.f32.mrf.mxu0
  %9729 = vmatprep.mubr.f32.mxu0 0.0
  %9730 = vmatmul.mubr.f32.gmra.mxu0 %v9437
  %v9731 = vpop.f32.mrf.mxu0
  %v9732 = vadd.f32 0.0, %v9731
  %v9733 = vpop.f32.mrf.mxu0
  %9734 = vmatprep.mubr.f32.mxu0 0.0
  %9735 = vmatmul.mubr.f32.gmra.mxu0 %v9440
  %v9736 = vpop.f32.mrf.mxu0
  %v9737 = vadd.f32 0.0, %v9736
  %v9738 = vpop.f32.mrf.mxu0
  %9739 = vmatprep.mubr.f32.mxu0 0.0
  %9740 = vmatmul.mubr.f32.gmra.mxu0 %v9443
  %v9741 = vpop.f32.mrf.mxu0
  %v9742 = vadd.f32 0.0, %v9741
  %v9743 = vpop.f32.mrf.mxu0
  %9744 = vmatprep.mubr.f32.mxu0 0.0
  %9745 = vmatmul.mubr.f32.gmra.mxu0 %v9446
  %v9746 = vpop.f32.mrf.mxu0
  %v9747 = vadd.f32 0.0, %v9746
  %v9748 = vpop.f32.mrf.mxu0
  %9749 = vmatprep.mubr.f32.mxu0 0.0
  %9750 = vmatmul.mubr.f32.gmra.mxu0 %v9449
  %v9751 = vpop.f32.mrf.mxu0
  %v9752 = vadd.f32 0.0, %v9751
  %v9753 = vpop.f32.mrf.mxu0
  %9754 = vmatprep.mubr.f32.mxu0 0.0
  %9755 = vmatmul.mubr.f32.gmra.mxu0 %v9452
  %v9756 = vpop.f32.mrf.mxu0
  %v9757 = vadd.f32 0.0, %v9756
  %v9758 = vpop.f32.mrf.mxu0
  %9759 = vmatprep.mubr.f32.mxu0 0.0
  %9760 = vmatmul.mubr.f32.gmra.mxu0 %v9455
  %v9761 = vpop.f32.mrf.mxu0
  %v9762 = vadd.f32 0.0, %v9761
  %v9763 = vpop.f32.mrf.mxu0
  %9764 = vmatprep.mubr.f32.mxu0 0.0
  %9765 = vmatmul.mubr.f32.gmra.mxu0 %v9458
  %v9766 = vpop.f32.mrf.mxu0
  %v9767 = vadd.f32 0.0, %v9766
  %v9768 = vpop.f32.mrf.mxu0
  %9769 = vmatprep.mubr.f32.mxu0 0.0
  %9770 = vmatmul.mubr.f32.gmra.mxu0 %v9461
  %v9771 = vpop.f32.mrf.mxu0
  %v9772 = vadd.f32 0.0, %v9771
  %v9773 = vpop.f32.mrf.mxu0
  %9774 = vmatprep.mubr.f32.mxu0 0.0
  %9775 = vmatmul.mubr.f32.gmra.mxu0 %v9464
  %v9776 = vpop.f32.mrf.mxu0
  %v9777 = vadd.f32 0.0, %v9776
  %v9778 = vpop.f32.mrf.mxu0
  %9779 = vmatprep.mubr.f32.mxu0 0.0
  %9780 = vmatmul.mubr.f32.gmra.mxu0 %v9467
  %v9781 = vpop.f32.mrf.mxu0
  %v9782 = vadd.f32 0.0, %v9781
  %v9783 = vpop.f32.mrf.mxu0
  %9784 = vmatprep.mubr.f32.mxu0 0.0
  %9785 = vmatmul.mubr.f32.gmra.mxu0 %v9470
  %v9786 = vpop.f32.mrf.mxu0
  %v9787 = vadd.f32 0.0, %v9786
  %v9788 = vpop.f32.mrf.mxu0
  %9789 = vmatprep.mubr.f32.mxu0 0.0
  %9790 = vmatmul.mubr.f32.gmra.mxu0 %v9473
  %v9791 = vpop.f32.mrf.mxu0
  %v9792 = vadd.f32 0.0, %v9791
  %v9793 = vpop.f32.mrf.mxu0
  %9794 = vmatprep.mubr.f32.mxu0 0.0
  %9795 = vmatmul.mubr.f32.gmra.mxu0 %v9476
  %v9796 = vpop.f32.mrf.mxu0
  %v9797 = vadd.f32 0.0, %v9796
  %v9798 = vpop.f32.mrf.mxu0
  %9799 = vmatprep.mubr.f32.mxu0 0.0
  %9800 = vmatmul.mubr.f32.gmra.mxu0 %v9479
  %v9801 = vpop.f32.mrf.mxu0
  %v9802 = vadd.f32 0.0, %v9801
  %v9803 = vpop.f32.mrf.mxu0
  %9804 = vmatprep.mubr.f32.mxu0 0.0
  %9805 = vmatmul.mubr.f32.gmra.mxu0 %v9482
  %v9806 = vpop.f32.mrf.mxu0
  %v9807 = vadd.f32 0.0, %v9806
  %v9808 = vpop.f32.mrf.mxu0
  %9809 = vmatprep.mubr.f32.mxu0 0.0
  %9810 = vmatmul.mubr.f32.gmra.mxu0 %v9485
  %v9811 = vpop.f32.mrf.mxu0
  %v9812 = vadd.f32 0.0, %v9811
  %v9813 = vpop.f32.mrf.mxu0
  %9814 = vmatprep.mubr.f32.mxu0 0.0
  %9815 = vmatmul.mubr.f32.gmra.mxu0 %v9488
  %v9816 = vpop.f32.mrf.mxu0
  %v9817 = vadd.f32 0.0, %v9816
  %v9818 = vpop.f32.mrf.mxu0
  %9819 = vmatprep.mubr.f32.mxu0 0.0
  %9820 = vmatmul.mubr.f32.gmra.mxu0 %v9491
  %v9821 = vpop.f32.mrf.mxu0
  %v9822 = vadd.f32 0.0, %v9821
  %v9823 = vpop.f32.mrf.mxu0
  %9824 = vmatprep.mubr.f32.mxu0 0.0
  %9825 = vmatmul.mubr.f32.gmra.mxu0 %v9494
  %v9826 = vpop.f32.mrf.mxu0
  %v9827 = vadd.f32 0.0, %v9826
  %v9828 = vpop.f32.mrf.mxu0
  %9829 = vmatprep.mubr.f32.mxu0 0.0
  %9830 = vmatmul.mubr.f32.gmra.mxu0 %v9497
  %v9831 = vpop.f32.mrf.mxu0
  %v9832 = vadd.f32 0.0, %v9831
  %v9833 = vpop.f32.mrf.mxu0
  %9834 = vmatprep.mubr.f32.mxu0 0.0
  %9835 = vmatmul.mubr.f32.gmra.mxu0 %v9500
  %v9836 = vpop.f32.mrf.mxu0
  %v9837 = vadd.f32 0.0, %v9836
  %v9838 = vpop.f32.mrf.mxu0
  %9839 = vmatprep.mubr.f32.mxu0 0.0
  %9840 = vmatmul.mubr.f32.gmra.mxu0 %v9503
  %v9841 = vpop.f32.mrf.mxu0
  %v9842 = vadd.f32 0.0, %v9841
  %v9843 = vpop.f32.mrf.mxu0
  %9844 = vmatprep.mubr.f32.mxu0 0.0
  %9845 = vmatmul.mubr.f32.gmra.mxu0 %v9506
  %v9846 = vpop.f32.mrf.mxu0
  %v9847 = vadd.f32 0.0, %v9846
  %v9848 = vpop.f32.mrf.mxu0
  %9849 = vmatprep.mubr.f32.mxu0 0.0
  %9850 = vmatmul.mubr.f32.gmra.mxu0 %v9509
  %v9851 = vpop.f32.mrf.mxu0
  %v9852 = vadd.f32 0.0, %v9851
  %v9853 = vpop.f32.mrf.mxu0
  %9854 = vmatprep.mubr.f32.mxu0 0.0
  %9855 = vmatmul.mubr.f32.gmra.mxu0 %v9512
  %v9856 = vpop.f32.mrf.mxu0
  %v9857 = vadd.f32 0.0, %v9856
  %v9858 = vpop.f32.mrf.mxu0
  %9859 = vmatprep.mubr.f32.mxu0 0.0
  %9860 = vmatmul.mubr.f32.gmra.mxu0 %v9515
  %v9861 = vpop.f32.mrf.mxu0
  %v9862 = vadd.f32 0.0, %v9861
  %v9863 = vpop.f32.mrf.mxu0
  %9864 = vmatprep.mubr.f32.mxu0 0.0
  %9865 = vmatmul.mubr.f32.gmra.mxu0 %v9518
  %v9866 = vpop.f32.mrf.mxu0
  %v9867 = vadd.f32 0.0, %v9866
  %v9868 = vpop.f32.mrf.mxu0
  %9869 = vmatprep.mubr.f32.mxu0 0.0
  %9870 = vmatmul.mubr.f32.gmra.mxu0 %v9521
  %v9871 = vpop.f32.mrf.mxu0
  %v9872 = vadd.f32 0.0, %v9871
  %v9873 = vpop.f32.mrf.mxu0
  %9874 = vmatprep.mubr.f32.mxu0 0.0
  %9875 = vmatmul.mubr.f32.gmra.mxu0 %v9524
  %v9876 = vpop.f32.mrf.mxu0
  %v9877 = vadd.f32 0.0, %v9876
  %v9878 = vpop.f32.mrf.mxu0
  %9879 = vmatprep.mubr.f32.mxu0 0.0
  %9880 = vmatmul.mubr.f32.gmra.mxu0 %v9527
  %v9881 = vpop.f32.mrf.mxu0
  %v9882 = vadd.f32 0.0, %v9881
  %v9883 = vpop.f32.mrf.mxu0
  %9884 = vmatprep.mubr.f32.mxu0 0.0
  %9885 = vmatmul.mubr.f32.gmra.mxu0 %v9530
  %v9886 = vpop.f32.mrf.mxu0
  %v9887 = vadd.f32 0.0, %v9886
  %v9888 = vpop.f32.mrf.mxu0
  %9889 = vmatprep.mubr.f32.mxu0 0.0
  %9890 = vmatmul.mubr.f32.gmra.mxu0 %v9533
  %v9891 = vpop.f32.mrf.mxu0
  %v9892 = vadd.f32 0.0, %v9891
  %v9893 = vpop.f32.mrf.mxu0
  %9894 = vmatprep.mubr.f32.mxu0 0.0
  %9895 = vmatmul.mubr.f32.gmra.mxu0 %v9536
  %v9896 = vpop.f32.mrf.mxu0
  %v9897 = vadd.f32 0.0, %v9896
  %v9898 = vpop.f32.mrf.mxu0
  %9899 = vmatprep.mubr.f32.mxu0 0.0
  %9900 = vmatmul.mubr.f32.gmra.mxu0 %v9539
  %v9901 = vpop.f32.mrf.mxu0
  %v9902 = vadd.f32 0.0, %v9901
  %v9903 = vpop.f32.mrf.mxu0
  %9904 = vmatprep.mubr.f32.mxu0 0.0
  %9905 = vmatmul.mubr.f32.gmra.mxu0 %v9542
  %v9906 = vpop.f32.mrf.mxu0
  %v9907 = vadd.f32 0.0, %v9906
  %v9908 = vpop.f32.mrf.mxu0
  %9909 = vmatprep.mubr.f32.mxu0 0.0
  %9910 = vmatmul.mubr.f32.gmra.mxu0 %v9545
  %v9911 = vpop.f32.mrf.mxu0
  %v9912 = vadd.f32 0.0, %v9911
  %v9913 = vpop.f32.mrf.mxu0
  %9914 = vmatprep.mubr.f32.mxu0 0.0
  %9915 = vmatmul.mubr.f32.gmra.mxu0 %v9548
  %v9916 = vpop.f32.mrf.mxu0
  %v9917 = vadd.f32 0.0, %v9916
  %v9918 = vpop.f32.mrf.mxu0
  %9919 = vmatprep.mubr.f32.mxu0 0.0
  %9920 = vmatmul.mubr.f32.gmra.mxu0 %v9551
  %v9921 = vpop.f32.mrf.mxu0
  %v9922 = vadd.f32 0.0, %v9921
  %v9923 = vpop.f32.mrf.mxu0
  %9924 = vmatprep.mubr.f32.mxu0 0.0
  %9925 = vmatmul.mubr.f32.gmra.mxu0 %v9554
  %v9926 = vpop.f32.mrf.mxu0
  %v9927 = vadd.f32 0.0, %v9926
  %v9928 = vpop.f32.mrf.mxu0
  %9929 = vmatprep.mubr.f32.mxu0 0.0
  %9930 = vmatmul.mubr.f32.gmra.mxu0 %v9557
  %v9931 = vpop.f32.mrf.mxu0
  %v9932 = vadd.f32 0.0, %v9931
  %v9933 = vpop.f32.mrf.mxu0
  %9934 = vmatprep.mubr.f32.mxu0 0.0
  %9935 = vmatmul.mubr.f32.gmra.mxu0 %v9560
  %v9936 = vpop.f32.mrf.mxu0
  %v9937 = vadd.f32 0.0, %v9936
  %v9938 = vpop.f32.mrf.mxu0
  %9939 = vmatprep.mubr.f32.mxu0 0.0
  %9940 = vmatmul.mubr.f32.gmra.mxu0 %v9563
  %v9941 = vpop.f32.mrf.mxu0
  %v9942 = vadd.f32 0.0, %v9941
  %v9943 = vpop.f32.mrf.mxu0
  %9944 = vmatprep.mubr.f32.mxu0 0.0
  %9945 = vmatmul.mubr.f32.gmra.mxu0 %v9566
  %v9946 = vpop.f32.mrf.mxu0
  %v9947 = vadd.f32 0.0, %v9946
  %v9948 = vpop.f32.mrf.mxu0
  %9949 = vmatprep.mubr.f32.mxu0 0.0
  %9950 = vmatmul.mubr.f32.gmra.mxu0 %v9569
  %v9951 = vpop.f32.mrf.mxu0
  %v9952 = vadd.f32 0.0, %v9951
  %v9953 = vpop.f32.mrf.mxu0
  %9954 = vmatprep.mubr.f32.mxu0 0.0
  %9955 = vmatmul.mubr.f32.gmra.mxu0 %v9572
  %v9956 = vpop.f32.mrf.mxu0
  %v9957 = vadd.f32 0.0, %v9956
  %v9958 = vpop.f32.mrf.mxu0
  %9959 = vmatprep.mubr.f32.mxu0 0.0
  %9960 = vmatmul.mubr.f32.gmra.mxu0 %v9575
  %v9961 = vpop.f32.mrf.mxu0
  %v9962 = vadd.f32 0.0, %v9961
  %v9963 = vpop.f32.mrf.mxu0
  %9964 = vdwg.mxu0
  %v9965 = vadd.f32 %v9255, %v9647
  %v9966 = vadd.f32 %v9256, %v9652
  %v9967 = vadd.f32 %v9257, %v9657
  %v9968 = vadd.f32 %v9258, %v9662
  %v9969 = vadd.f32 %v9259, %v9667
  %v9970 = vadd.f32 %v9260, %v9672
  %v9971 = vadd.f32 %v9261, %v9677
  %v9972 = vadd.f32 %v9262, %v9682
  %v9973 = vadd.f32 %v9263, %v9687
  %v9974 = vadd.f32 %v9264, %v9692
  %v9975 = vadd.f32 %v9265, %v9697
  %v9976 = vadd.f32 %v9266, %v9702
  %v9977 = vadd.f32 %v9267, %v9707
  %v9978 = vadd.f32 %v9268, %v9712
  %v9979 = vadd.f32 %v9269, %v9717
  %v9980 = vadd.f32 %v9270, %v9722
  %v9981 = vadd.f32 %v9271, %v9727
  %v9982 = vadd.f32 %v9272, %v9732
  %v9983 = vadd.f32 %v9273, %v9737
  %v9984 = vadd.f32 %v9274, %v9742
  %v9985 = vadd.f32 %v9275, %v9747
  %v9986 = vadd.f32 %v9276, %v9752
  %v9987 = vadd.f32 %v9277, %v9757
  %v9988 = vadd.f32 %v9278, %v9762
  %v9989 = vadd.f32 %v9279, %v9767
  %v9990 = vadd.f32 %v9280, %v9772
  %v9991 = vadd.f32 %v9281, %v9777
  %v9992 = vadd.f32 %v9282, %v9782
  %v9993 = vadd.f32 %v9283, %v9787
  %v9994 = vadd.f32 %v9284, %v9792
  %v9995 = vadd.f32 %v9285, %v9797
  %v9996 = vadd.f32 %v9286, %v9802
  %v9997 = vadd.f32 %v9287, %v9807
  %v9998 = vadd.f32 %v9288, %v9812
  %v9999 = vadd.f32 %v9289, %v9817
  %v10000 = vadd.f32 %v9290, %v9822
  %v10001 = vadd.f32 %v9291, %v9827
  %v10002 = vadd.f32 %v9292, %v9832
  %v10003 = vadd.f32 %v9293, %v9837
  %v10004 = vadd.f32 %v9294, %v9842
  %v10005 = vadd.f32 %v9295, %v9847
  %v10006 = vadd.f32 %v9296, %v9852
  %v10007 = vadd.f32 %v9297, %v9857
  %v10008 = vadd.f32 %v9298, %v9862
  %v10009 = vadd.f32 %v9299, %v9867
  %v10010 = vadd.f32 %v9300, %v9872
  %v10011 = vadd.f32 %v9301, %v9877
  %v10012 = vadd.f32 %v9302, %v9882
  %v10013 = vadd.f32 %v9303, %v9887
  %v10014 = vadd.f32 %v9304, %v9892
  %v10015 = vadd.f32 %v9305, %v9897
  %v10016 = vadd.f32 %v9306, %v9902
  %v10017 = vadd.f32 %v9307, %v9907
  %v10018 = vadd.f32 %v9308, %v9912
  %v10019 = vadd.f32 %v9309, %v9917
  %v10020 = vadd.f32 %v9310, %v9922
  %v10021 = vadd.f32 %v9311, %v9927
  %v10022 = vadd.f32 %v9312, %v9932
  %v10023 = vadd.f32 %v9313, %v9937
  %v10024 = vadd.f32 %v9314, %v9942
  %v10025 = vadd.f32 %v9315, %v9947
  %v10026 = vadd.f32 %v9316, %v9952
  %v10027 = vadd.f32 %v9317, %v9957
  %v10028 = vadd.f32 %v9318, %v9962
  %v10029 = vld [vmem:[%s78 + $0x1] sm:$0xff]
  %v10030 = vld [vmem:[%s78 + $0x9] sm:$0xff]
  %v10031 = vld [vmem:[%s78 + $0x19] sm:$0xff]
  %v10032 = vld [vmem:[%s78 + $0x21] sm:$0xff]
  %v10033 = vld [vmem:[%s78 + $0x31] sm:$0xff]
  %v10034 = vld [vmem:[%s78 + $0x39] sm:$0xff]
  %v10035 = vld [vmem:[%s78 + $0x49] sm:$0xff]
  %v10036 = vld [vmem:[%s78 + $0x51] sm:$0xff]
  %v10037 = vld [vmem:[%s78 + $0x61] sm:$0xff]
  %v10038 = vld [vmem:[%s78 + $0x69] sm:$0xff]
  %v10039 = vld [vmem:[%s78 + $0x79] sm:$0xff]
  %v10040 = vld [vmem:[%s78 + $0x81] sm:$0xff]
  %v10041 = vld [vmem:[%s78 + $0x91] sm:$0xff]
  %v10042 = vld [vmem:[%s78 + $0x99] sm:$0xff]
  %v10043 = vld [vmem:[%s78 + $0xa9] sm:$0xff]
  %v10044 = vld [vmem:[%s78 + $0xb1] sm:$0xff]
  %v10045 = vld [vmem:[%s78 + $0xc1] sm:$0xff]
  %v10046 = vld [vmem:[%s78 + $0xc9] sm:$0xff]
  %v10047 = vld [vmem:[%s78 + $0xd9] sm:$0xff]
  %v10048 = vld [vmem:[%s78 + $0xe1] sm:$0xff]
  %v10049 = vld [vmem:[%s78 + $0xf1] sm:$0xff]
  %v10050 = vld [vmem:[%s78 + $0xf9] sm:$0xff]
  %v10051 = vld [vmem:[%s78 + $0x109] sm:$0xff]
  %v10052 = vld [vmem:[%s78 + $0x111] sm:$0xff]
  %v10053 = vld [vmem:[%s78 + $0x121] sm:$0xff]
  %v10054 = vld [vmem:[%s78 + $0x129] sm:$0xff]
  %v10055 = vld [vmem:[%s78 + $0x139] sm:$0xff]
  %v10056 = vld [vmem:[%s78 + $0x141] sm:$0xff]
  %v10057 = vld [vmem:[%s78 + $0x151] sm:$0xff]
  %v10058 = vld [vmem:[%s78 + $0x159] sm:$0xff]
  %v10059 = vld [vmem:[%s78 + $0x169] sm:$0xff]
  %v10060 = vld [vmem:[%s78 + $0x171] sm:$0xff]
  %v10061 = vld [vmem:[%s78 + $0x1b1] sm:$0xff]
  %v10062 = vld [vmem:[%s78 + $0x1b9] sm:$0xff]
  %v10063 = vld [vmem:[%s78 + $0x1c9] sm:$0xff]
  %v10064 = vld [vmem:[%s78 + $0x1d1] sm:$0xff]
  %v10065 = vld [vmem:[%s78 + $0x1e1] sm:$0xff]
  %v10066 = vld [vmem:[%s78 + $0x1e9] sm:$0xff]
  %v10067 = vld [vmem:[%s78 + $0x1f9] sm:$0xff]
  %v10068 = vld [vmem:[%s78 + $0x201] sm:$0xff]
  %v10069 = vld [vmem:[%s78 + $0x211] sm:$0xff]
  %v10070 = vld [vmem:[%s78 + $0x219] sm:$0xff]
  %v10071 = vld [vmem:[%s78 + $0x229] sm:$0xff]
  %v10072 = vld [vmem:[%s78 + $0x231] sm:$0xff]
  %v10073 = vld [vmem:[%s78 + $0x241] sm:$0xff]
  %v10074 = vld [vmem:[%s78 + $0x249] sm:$0xff]
  %v10075 = vld [vmem:[%s78 + $0x259] sm:$0xff]
  %v10076 = vld [vmem:[%s78 + $0x261] sm:$0xff]
  %v10077 = vld [vmem:[%s78 + $0x271] sm:$0xff]
  %v10078 = vld [vmem:[%s78 + $0x279] sm:$0xff]
  %v10079 = vld [vmem:[%s78 + $0x289] sm:$0xff]
  %v10080 = vld [vmem:[%s78 + $0x291] sm:$0xff]
  %v10081 = vld [vmem:[%s78 + $0x2a1] sm:$0xff]
  %v10082 = vld [vmem:[%s78 + $0x2a9] sm:$0xff]
  %v10083 = vld [vmem:[%s78 + $0x2b9] sm:$0xff]
  %v10084 = vld [vmem:[%s78 + $0x2c1] sm:$0xff]
  %v10085 = vld [vmem:[%s78 + $0x2d1] sm:$0xff]
  %v10086 = vld [vmem:[%s78 + $0x2d9] sm:$0xff]
  %v10087 = vld [vmem:[%s78 + $0x2e9] sm:$0xff]
  %v10088 = vld [vmem:[%s78 + $0x2f1] sm:$0xff]
  %v10089 = vld [vmem:[%s78 + $0x301] sm:$0xff]
  %v10090 = vld [vmem:[%s78 + $0x309] sm:$0xff]
  %v10091 = vld [vmem:[%s78 + $0x319] sm:$0xff]
  %v10092 = vld [vmem:[%s78 + $0x321] sm:$0xff]
  %s10093 = scalar_lea.vmem %s2, 16
  %v10094 = vld [vmem:[%s10093] sm:$0xf]
  %v10096 = vsel %vm79, %v10029, 0
  %v10099 = vsel %vm79, %v10030, 0
  %v10102 = vsel %vm79, %v10031, 0
  %v10105 = vsel %vm79, %v10032, 0
  %v10108 = vsel %vm79, %v10033, 0
  %v10111 = vsel %vm79, %v10034, 0
  %v10114 = vsel %vm79, %v10035, 0
  %v10117 = vsel %vm79, %v10036, 0
  %v10120 = vsel %vm79, %v10037, 0
  %v10123 = vsel %vm79, %v10038, 0
  %v10126 = vsel %vm79, %v10039, 0
  %v10129 = vsel %vm79, %v10040, 0
  %v10132 = vsel %vm79, %v10041, 0
  %v10135 = vsel %vm79, %v10042, 0
  %v10138 = vsel %vm79, %v10043, 0
  %v10141 = vsel %vm79, %v10044, 0
  %v10144 = vsel %vm79, %v10045, 0
  %v10147 = vsel %vm79, %v10046, 0
  %v10150 = vsel %vm79, %v10047, 0
  %v10153 = vsel %vm79, %v10048, 0
  %v10156 = vsel %vm79, %v10049, 0
  %v10159 = vsel %vm79, %v10050, 0
  %v10162 = vsel %vm79, %v10051, 0
  %v10165 = vsel %vm79, %v10052, 0
  %v10168 = vsel %vm79, %v10053, 0
  %v10171 = vsel %vm79, %v10054, 0
  %v10174 = vsel %vm79, %v10055, 0
  %v10177 = vsel %vm79, %v10056, 0
  %v10180 = vsel %vm79, %v10057, 0
  %v10183 = vsel %vm79, %v10058, 0
  %v10186 = vsel %vm79, %v10059, 0
  %v10189 = vsel %vm79, %v10060, 0
  %v10192 = vsel %vm79, %v10061, 0
  %v10195 = vsel %vm79, %v10062, 0
  %v10198 = vsel %vm79, %v10063, 0
  %v10201 = vsel %vm79, %v10064, 0
  %v10204 = vsel %vm79, %v10065, 0
  %v10207 = vsel %vm79, %v10066, 0
  %v10210 = vsel %vm79, %v10067, 0
  %v10213 = vsel %vm79, %v10068, 0
  %v10216 = vsel %vm79, %v10069, 0
  %v10219 = vsel %vm79, %v10070, 0
  %v10222 = vsel %vm79, %v10071, 0
  %v10225 = vsel %vm79, %v10072, 0
  %v10228 = vsel %vm79, %v10073, 0
  %v10231 = vsel %vm79, %v10074, 0
  %v10234 = vsel %vm79, %v10075, 0
  %v10237 = vsel %vm79, %v10076, 0
  %v10240 = vsel %vm79, %v10077, 0
  %v10243 = vsel %vm79, %v10078, 0
  %v10246 = vsel %vm79, %v10079, 0
  %v10249 = vsel %vm79, %v10080, 0
  %v10252 = vsel %vm79, %v10081, 0
  %v10255 = vsel %vm79, %v10082, 0
  %v10258 = vsel %vm79, %v10083, 0
  %v10261 = vsel %vm79, %v10084, 0
  %v10264 = vsel %vm79, %v10085, 0
  %v10267 = vsel %vm79, %v10086, 0
  %v10270 = vsel %vm79, %v10087, 0
  %v10273 = vsel %vm79, %v10088, 0
  %v10276 = vsel %vm79, %v10089, 0
  %v10279 = vsel %vm79, %v10090, 0
  %v10282 = vsel %vm79, %v10091, 0
  %v10285 = vsel %vm79, %v10092, 0
  %v10288 = vsel %vm621, %v10094, 0
  %10290 = vmatprep.subr.mxu0 0.0
  %10291 = vmatpush1.msra.mxu0 0.0
  %10292 = vmatprep.subr.mxu0 0.0
  %10293 = vmatpush1.msra.mxu0 0.0
  %10294 = vmatprep.subr.mxu0 0.0
  %10295 = vmatpush1.msra.mxu0 0.0
  %10296 = vmatprep.subr.mxu0 0.0
  %10297 = vmatpush1.msra.mxu0 0.0
  %10298 = vmatprep.subr.mxu0 0.0
  %10299 = vmatpush1.msra.mxu0 0.0
  %10300 = vmatprep.subr.mxu0 0.0
  %10301 = vmatpush1.msra.mxu0 0.0
  %10302 = vmatprep.subr.mxu0 0.0
  %10303 = vmatpush1.msra.mxu0 0.0
  %10304 = vmatprep.subr.mxu0 0.0
  %10305 = vmatpush1.msra.mxu0 0.0
  %10306 = vmatprep.subr.mxu0 0.0
  %10307 = vmatpush1.msra.mxu0 0.0
  %10308 = vmatprep.subr.mxu0 0.0
  %10309 = vmatpush1.msra.mxu0 0.0
  %10310 = vmatprep.subr.mxu0 0.0
  %10311 = vmatpush1.msra.mxu0 0.0
  %10312 = vmatprep.subr.mxu0 0.0
  %10313 = vmatpush1.msra.mxu0 0.0
  %10314 = vmatprep.subr.mxu0 0.0
  %10315 = vmatpush1.msra.mxu0 0.0
  %10316 = vmatprep.subr.mxu0 0.0
  %10317 = vmatpush1.msra.mxu0 0.0
  %10318 = vmatprep.subr.mxu0 0.0
  %10319 = vmatpush1.msra.mxu0 0.0
  %10320 = vmatprep.subr.mxu0 0.0
  %10321 = vmatpush1.msra.mxu0 %v10288
  %10322 = vmatprep.subr.mxu0 0.0
  %10323 = vmatpush2.msra.mxu0 0.0
  %10324 = vmatprep.subr.mxu0 0.0
  %10325 = vmatpush2.msra.mxu0 0.0
  %10326 = vmatprep.subr.mxu0 0.0
  %10327 = vmatpush2.msra.mxu0 0.0
  %10328 = vmatprep.subr.mxu0 0.0
  %10329 = vmatpush2.msra.mxu0 0.0
  %10330 = vmatprep.subr.mxu0 0.0
  %10331 = vmatpush2.msra.mxu0 0.0
  %10332 = vmatprep.subr.mxu0 0.0
  %10333 = vmatpush2.msra.mxu0 0.0
  %10334 = vmatprep.subr.mxu0 0.0
  %10335 = vmatpush2.msra.mxu0 0.0
  %10336 = vmatprep.subr.mxu0 0.0
  %10337 = vmatpush2.msra.mxu0 0.0
  %10338 = vmatprep.subr.mxu0 0.0
  %10339 = vmatpush2.msra.mxu0 0.0
  %10340 = vmatprep.subr.mxu0 0.0
  %10341 = vmatpush2.msra.mxu0 0.0
  %10342 = vmatprep.subr.mxu0 0.0
  %10343 = vmatpush2.msra.mxu0 0.0
  %10344 = vmatprep.subr.mxu0 0.0
  %10345 = vmatpush2.msra.mxu0 0.0
  %10346 = vmatprep.subr.mxu0 0.0
  %10347 = vmatpush2.msra.mxu0 0.0
  %10348 = vmatprep.subr.mxu0 0.0
  %10349 = vmatpush2.msra.mxu0 0.0
  %10350 = vmatprep.subr.mxu0 0.0
  %10351 = vmatpush2.msra.mxu0 0.0
  %10352 = vmatprep.subr.mxu0 0.0
  %10353 = vmatpush2.msra.mxu0 0.0
  %10354 = vmatprep.mubr.f32.mxu0 0.0
  %10355 = vmatmul.mubr.f32.gmra.mxu0 %v10096
  %v10356 = vpop.f32.mrf.mxu0
  %v10357 = vadd.f32 0.0, %v10356
  %v10358 = vpop.f32.mrf.mxu0
  %10359 = vmatprep.mubr.f32.mxu0 0.0
  %10360 = vmatmul.mubr.f32.gmra.mxu0 %v10099
  %v10361 = vpop.f32.mrf.mxu0
  %v10362 = vadd.f32 0.0, %v10361
  %v10363 = vpop.f32.mrf.mxu0
  %10364 = vmatprep.mubr.f32.mxu0 0.0
  %10365 = vmatmul.mubr.f32.gmra.mxu0 %v10102
  %v10366 = vpop.f32.mrf.mxu0
  %v10367 = vadd.f32 0.0, %v10366
  %v10368 = vpop.f32.mrf.mxu0
  %10369 = vmatprep.mubr.f32.mxu0 0.0
  %10370 = vmatmul.mubr.f32.gmra.mxu0 %v10105
  %v10371 = vpop.f32.mrf.mxu0
  %v10372 = vadd.f32 0.0, %v10371
  %v10373 = vpop.f32.mrf.mxu0
  %10374 = vmatprep.mubr.f32.mxu0 0.0
  %10375 = vmatmul.mubr.f32.gmra.mxu0 %v10108
  %v10376 = vpop.f32.mrf.mxu0
  %v10377 = vadd.f32 0.0, %v10376
  %v10378 = vpop.f32.mrf.mxu0
  %10379 = vmatprep.mubr.f32.mxu0 0.0
  %10380 = vmatmul.mubr.f32.gmra.mxu0 %v10111
  %v10381 = vpop.f32.mrf.mxu0
  %v10382 = vadd.f32 0.0, %v10381
  %v10383 = vpop.f32.mrf.mxu0
  %10384 = vmatprep.mubr.f32.mxu0 0.0
  %10385 = vmatmul.mubr.f32.gmra.mxu0 %v10114
  %v10386 = vpop.f32.mrf.mxu0
  %v10387 = vadd.f32 0.0, %v10386
  %v10388 = vpop.f32.mrf.mxu0
  %10389 = vmatprep.mubr.f32.mxu0 0.0
  %10390 = vmatmul.mubr.f32.gmra.mxu0 %v10117
  %v10391 = vpop.f32.mrf.mxu0
  %v10392 = vadd.f32 0.0, %v10391
  %v10393 = vpop.f32.mrf.mxu0
  %10394 = vmatprep.mubr.f32.mxu0 0.0
  %10395 = vmatmul.mubr.f32.gmra.mxu0 %v10120
  %v10396 = vpop.f32.mrf.mxu0
  %v10397 = vadd.f32 0.0, %v10396
  %v10398 = vpop.f32.mrf.mxu0
  %10399 = vmatprep.mubr.f32.mxu0 0.0
  %10400 = vmatmul.mubr.f32.gmra.mxu0 %v10123
  %v10401 = vpop.f32.mrf.mxu0
  %v10402 = vadd.f32 0.0, %v10401
  %v10403 = vpop.f32.mrf.mxu0
  %10404 = vmatprep.mubr.f32.mxu0 0.0
  %10405 = vmatmul.mubr.f32.gmra.mxu0 %v10126
  %v10406 = vpop.f32.mrf.mxu0
  %v10407 = vadd.f32 0.0, %v10406
  %v10408 = vpop.f32.mrf.mxu0
  %10409 = vmatprep.mubr.f32.mxu0 0.0
  %10410 = vmatmul.mubr.f32.gmra.mxu0 %v10129
  %v10411 = vpop.f32.mrf.mxu0
  %v10412 = vadd.f32 0.0, %v10411
  %v10413 = vpop.f32.mrf.mxu0
  %10414 = vmatprep.mubr.f32.mxu0 0.0
  %10415 = vmatmul.mubr.f32.gmra.mxu0 %v10132
  %v10416 = vpop.f32.mrf.mxu0
  %v10417 = vadd.f32 0.0, %v10416
  %v10418 = vpop.f32.mrf.mxu0
  %10419 = vmatprep.mubr.f32.mxu0 0.0
  %10420 = vmatmul.mubr.f32.gmra.mxu0 %v10135
  %v10421 = vpop.f32.mrf.mxu0
  %v10422 = vadd.f32 0.0, %v10421
  %v10423 = vpop.f32.mrf.mxu0
  %10424 = vmatprep.mubr.f32.mxu0 0.0
  %10425 = vmatmul.mubr.f32.gmra.mxu0 %v10138
  %v10426 = vpop.f32.mrf.mxu0
  %v10427 = vadd.f32 0.0, %v10426
  %v10428 = vpop.f32.mrf.mxu0
  %10429 = vmatprep.mubr.f32.mxu0 0.0
  %10430 = vmatmul.mubr.f32.gmra.mxu0 %v10141
  %v10431 = vpop.f32.mrf.mxu0
  %v10432 = vadd.f32 0.0, %v10431
  %v10433 = vpop.f32.mrf.mxu0
  %10434 = vmatprep.mubr.f32.mxu0 0.0
  %10435 = vmatmul.mubr.f32.gmra.mxu0 %v10144
  %v10436 = vpop.f32.mrf.mxu0
  %v10437 = vadd.f32 0.0, %v10436
  %v10438 = vpop.f32.mrf.mxu0
  %10439 = vmatprep.mubr.f32.mxu0 0.0
  %10440 = vmatmul.mubr.f32.gmra.mxu0 %v10147
  %v10441 = vpop.f32.mrf.mxu0
  %v10442 = vadd.f32 0.0, %v10441
  %v10443 = vpop.f32.mrf.mxu0
  %10444 = vmatprep.mubr.f32.mxu0 0.0
  %10445 = vmatmul.mubr.f32.gmra.mxu0 %v10150
  %v10446 = vpop.f32.mrf.mxu0
  %v10447 = vadd.f32 0.0, %v10446
  %v10448 = vpop.f32.mrf.mxu0
  %10449 = vmatprep.mubr.f32.mxu0 0.0
  %10450 = vmatmul.mubr.f32.gmra.mxu0 %v10153
  %v10451 = vpop.f32.mrf.mxu0
  %v10452 = vadd.f32 0.0, %v10451
  %v10453 = vpop.f32.mrf.mxu0
  %10454 = vmatprep.mubr.f32.mxu0 0.0
  %10455 = vmatmul.mubr.f32.gmra.mxu0 %v10156
  %v10456 = vpop.f32.mrf.mxu0
  %v10457 = vadd.f32 0.0, %v10456
  %v10458 = vpop.f32.mrf.mxu0
  %10459 = vmatprep.mubr.f32.mxu0 0.0
  %10460 = vmatmul.mubr.f32.gmra.mxu0 %v10159
  %v10461 = vpop.f32.mrf.mxu0
  %v10462 = vadd.f32 0.0, %v10461
  %v10463 = vpop.f32.mrf.mxu0
  %10464 = vmatprep.mubr.f32.mxu0 0.0
  %10465 = vmatmul.mubr.f32.gmra.mxu0 %v10162
  %v10466 = vpop.f32.mrf.mxu0
  %v10467 = vadd.f32 0.0, %v10466
  %v10468 = vpop.f32.mrf.mxu0
  %10469 = vmatprep.mubr.f32.mxu0 0.0
  %10470 = vmatmul.mubr.f32.gmra.mxu0 %v10165
  %v10471 = vpop.f32.mrf.mxu0
  %v10472 = vadd.f32 0.0, %v10471
  %v10473 = vpop.f32.mrf.mxu0
  %10474 = vmatprep.mubr.f32.mxu0 0.0
  %10475 = vmatmul.mubr.f32.gmra.mxu0 %v10168
  %v10476 = vpop.f32.mrf.mxu0
  %v10477 = vadd.f32 0.0, %v10476
  %v10478 = vpop.f32.mrf.mxu0
  %10479 = vmatprep.mubr.f32.mxu0 0.0
  %10480 = vmatmul.mubr.f32.gmra.mxu0 %v10171
  %v10481 = vpop.f32.mrf.mxu0
  %v10482 = vadd.f32 0.0, %v10481
  %v10483 = vpop.f32.mrf.mxu0
  %10484 = vmatprep.mubr.f32.mxu0 0.0
  %10485 = vmatmul.mubr.f32.gmra.mxu0 %v10174
  %v10486 = vpop.f32.mrf.mxu0
  %v10487 = vadd.f32 0.0, %v10486
  %v10488 = vpop.f32.mrf.mxu0
  %10489 = vmatprep.mubr.f32.mxu0 0.0
  %10490 = vmatmul.mubr.f32.gmra.mxu0 %v10177
  %v10491 = vpop.f32.mrf.mxu0
  %v10492 = vadd.f32 0.0, %v10491
  %v10493 = vpop.f32.mrf.mxu0
  %10494 = vmatprep.mubr.f32.mxu0 0.0
  %10495 = vmatmul.mubr.f32.gmra.mxu0 %v10180
  %v10496 = vpop.f32.mrf.mxu0
  %v10497 = vadd.f32 0.0, %v10496
  %v10498 = vpop.f32.mrf.mxu0
  %10499 = vmatprep.mubr.f32.mxu0 0.0
  %10500 = vmatmul.mubr.f32.gmra.mxu0 %v10183
  %v10501 = vpop.f32.mrf.mxu0
  %v10502 = vadd.f32 0.0, %v10501
  %v10503 = vpop.f32.mrf.mxu0
  %10504 = vmatprep.mubr.f32.mxu0 0.0
  %10505 = vmatmul.mubr.f32.gmra.mxu0 %v10186
  %v10506 = vpop.f32.mrf.mxu0
  %v10507 = vadd.f32 0.0, %v10506
  %v10508 = vpop.f32.mrf.mxu0
  %10509 = vmatprep.mubr.f32.mxu0 0.0
  %10510 = vmatmul.mubr.f32.gmra.mxu0 %v10189
  %v10511 = vpop.f32.mrf.mxu0
  %v10512 = vadd.f32 0.0, %v10511
  %v10513 = vpop.f32.mrf.mxu0
  %10514 = vmatprep.mubr.f32.mxu0 0.0
  %10515 = vmatmul.mubr.f32.gmra.mxu0 %v10192
  %v10516 = vpop.f32.mrf.mxu0
  %v10517 = vadd.f32 0.0, %v10516
  %v10518 = vpop.f32.mrf.mxu0
  %10519 = vmatprep.mubr.f32.mxu0 0.0
  %10520 = vmatmul.mubr.f32.gmra.mxu0 %v10195
  %v10521 = vpop.f32.mrf.mxu0
  %v10522 = vadd.f32 0.0, %v10521
  %v10523 = vpop.f32.mrf.mxu0
  %10524 = vmatprep.mubr.f32.mxu0 0.0
  %10525 = vmatmul.mubr.f32.gmra.mxu0 %v10198
  %v10526 = vpop.f32.mrf.mxu0
  %v10527 = vadd.f32 0.0, %v10526
  %v10528 = vpop.f32.mrf.mxu0
  %10529 = vmatprep.mubr.f32.mxu0 0.0
  %10530 = vmatmul.mubr.f32.gmra.mxu0 %v10201
  %v10531 = vpop.f32.mrf.mxu0
  %v10532 = vadd.f32 0.0, %v10531
  %v10533 = vpop.f32.mrf.mxu0
  %10534 = vmatprep.mubr.f32.mxu0 0.0
  %10535 = vmatmul.mubr.f32.gmra.mxu0 %v10204
  %v10536 = vpop.f32.mrf.mxu0
  %v10537 = vadd.f32 0.0, %v10536
  %v10538 = vpop.f32.mrf.mxu0
  %10539 = vmatprep.mubr.f32.mxu0 0.0
  %10540 = vmatmul.mubr.f32.gmra.mxu0 %v10207
  %v10541 = vpop.f32.mrf.mxu0
  %v10542 = vadd.f32 0.0, %v10541
  %v10543 = vpop.f32.mrf.mxu0
  %10544 = vmatprep.mubr.f32.mxu0 0.0
  %10545 = vmatmul.mubr.f32.gmra.mxu0 %v10210
  %v10546 = vpop.f32.mrf.mxu0
  %v10547 = vadd.f32 0.0, %v10546
  %v10548 = vpop.f32.mrf.mxu0
  %10549 = vmatprep.mubr.f32.mxu0 0.0
  %10550 = vmatmul.mubr.f32.gmra.mxu0 %v10213
  %v10551 = vpop.f32.mrf.mxu0
  %v10552 = vadd.f32 0.0, %v10551
  %v10553 = vpop.f32.mrf.mxu0
  %10554 = vmatprep.mubr.f32.mxu0 0.0
  %10555 = vmatmul.mubr.f32.gmra.mxu0 %v10216
  %v10556 = vpop.f32.mrf.mxu0
  %v10557 = vadd.f32 0.0, %v10556
  %v10558 = vpop.f32.mrf.mxu0
  %10559 = vmatprep.mubr.f32.mxu0 0.0
  %10560 = vmatmul.mubr.f32.gmra.mxu0 %v10219
  %v10561 = vpop.f32.mrf.mxu0
  %v10562 = vadd.f32 0.0, %v10561
  %v10563 = vpop.f32.mrf.mxu0
  %10564 = vmatprep.mubr.f32.mxu0 0.0
  %10565 = vmatmul.mubr.f32.gmra.mxu0 %v10222
  %v10566 = vpop.f32.mrf.mxu0
  %v10567 = vadd.f32 0.0, %v10566
  %v10568 = vpop.f32.mrf.mxu0
  %10569 = vmatprep.mubr.f32.mxu0 0.0
  %10570 = vmatmul.mubr.f32.gmra.mxu0 %v10225
  %v10571 = vpop.f32.mrf.mxu0
  %v10572 = vadd.f32 0.0, %v10571
  %v10573 = vpop.f32.mrf.mxu0
  %10574 = vmatprep.mubr.f32.mxu0 0.0
  %10575 = vmatmul.mubr.f32.gmra.mxu0 %v10228
  %v10576 = vpop.f32.mrf.mxu0
  %v10577 = vadd.f32 0.0, %v10576
  %v10578 = vpop.f32.mrf.mxu0
  %10579 = vmatprep.mubr.f32.mxu0 0.0
  %10580 = vmatmul.mubr.f32.gmra.mxu0 %v10231
  %v10581 = vpop.f32.mrf.mxu0
  %v10582 = vadd.f32 0.0, %v10581
  %v10583 = vpop.f32.mrf.mxu0
  %10584 = vmatprep.mubr.f32.mxu0 0.0
  %10585 = vmatmul.mubr.f32.gmra.mxu0 %v10234
  %v10586 = vpop.f32.mrf.mxu0
  %v10587 = vadd.f32 0.0, %v10586
  %v10588 = vpop.f32.mrf.mxu0
  %10589 = vmatprep.mubr.f32.mxu0 0.0
  %10590 = vmatmul.mubr.f32.gmra.mxu0 %v10237
  %v10591 = vpop.f32.mrf.mxu0
  %v10592 = vadd.f32 0.0, %v10591
  %v10593 = vpop.f32.mrf.mxu0
  %10594 = vmatprep.mubr.f32.mxu0 0.0
  %10595 = vmatmul.mubr.f32.gmra.mxu0 %v10240
  %v10596 = vpop.f32.mrf.mxu0
  %v10597 = vadd.f32 0.0, %v10596
  %v10598 = vpop.f32.mrf.mxu0
  %10599 = vmatprep.mubr.f32.mxu0 0.0
  %10600 = vmatmul.mubr.f32.gmra.mxu0 %v10243
  %v10601 = vpop.f32.mrf.mxu0
  %v10602 = vadd.f32 0.0, %v10601
  %v10603 = vpop.f32.mrf.mxu0
  %10604 = vmatprep.mubr.f32.mxu0 0.0
  %10605 = vmatmul.mubr.f32.gmra.mxu0 %v10246
  %v10606 = vpop.f32.mrf.mxu0
  %v10607 = vadd.f32 0.0, %v10606
  %v10608 = vpop.f32.mrf.mxu0
  %10609 = vmatprep.mubr.f32.mxu0 0.0
  %10610 = vmatmul.mubr.f32.gmra.mxu0 %v10249
  %v10611 = vpop.f32.mrf.mxu0
  %v10612 = vadd.f32 0.0, %v10611
  %v10613 = vpop.f32.mrf.mxu0
  %10614 = vmatprep.mubr.f32.mxu0 0.0
  %10615 = vmatmul.mubr.f32.gmra.mxu0 %v10252
  %v10616 = vpop.f32.mrf.mxu0
  %v10617 = vadd.f32 0.0, %v10616
  %v10618 = vpop.f32.mrf.mxu0
  %10619 = vmatprep.mubr.f32.mxu0 0.0
  %10620 = vmatmul.mubr.f32.gmra.mxu0 %v10255
  %v10621 = vpop.f32.mrf.mxu0
  %v10622 = vadd.f32 0.0, %v10621
  %v10623 = vpop.f32.mrf.mxu0
  %10624 = vmatprep.mubr.f32.mxu0 0.0
  %10625 = vmatmul.mubr.f32.gmra.mxu0 %v10258
  %v10626 = vpop.f32.mrf.mxu0
  %v10627 = vadd.f32 0.0, %v10626
  %v10628 = vpop.f32.mrf.mxu0
  %10629 = vmatprep.mubr.f32.mxu0 0.0
  %10630 = vmatmul.mubr.f32.gmra.mxu0 %v10261
  %v10631 = vpop.f32.mrf.mxu0
  %v10632 = vadd.f32 0.0, %v10631
  %v10633 = vpop.f32.mrf.mxu0
  %10634 = vmatprep.mubr.f32.mxu0 0.0
  %10635 = vmatmul.mubr.f32.gmra.mxu0 %v10264
  %v10636 = vpop.f32.mrf.mxu0
  %v10637 = vadd.f32 0.0, %v10636
  %v10638 = vpop.f32.mrf.mxu0
  %10639 = vmatprep.mubr.f32.mxu0 0.0
  %10640 = vmatmul.mubr.f32.gmra.mxu0 %v10267
  %v10641 = vpop.f32.mrf.mxu0
  %v10642 = vadd.f32 0.0, %v10641
  %v10643 = vpop.f32.mrf.mxu0
  %10644 = vmatprep.mubr.f32.mxu0 0.0
  %10645 = vmatmul.mubr.f32.gmra.mxu0 %v10270
  %v10646 = vpop.f32.mrf.mxu0
  %v10647 = vadd.f32 0.0, %v10646
  %v10648 = vpop.f32.mrf.mxu0
  %10649 = vmatprep.mubr.f32.mxu0 0.0
  %10650 = vmatmul.mubr.f32.gmra.mxu0 %v10273
  %v10651 = vpop.f32.mrf.mxu0
  %v10652 = vadd.f32 0.0, %v10651
  %v10653 = vpop.f32.mrf.mxu0
  %10654 = vmatprep.mubr.f32.mxu0 0.0
  %10655 = vmatmul.mubr.f32.gmra.mxu0 %v10276
  %v10656 = vpop.f32.mrf.mxu0
  %v10657 = vadd.f32 0.0, %v10656
  %v10658 = vpop.f32.mrf.mxu0
  %10659 = vmatprep.mubr.f32.mxu0 0.0
  %10660 = vmatmul.mubr.f32.gmra.mxu0 %v10279
  %v10661 = vpop.f32.mrf.mxu0
  %v10662 = vadd.f32 0.0, %v10661
  %v10663 = vpop.f32.mrf.mxu0
  %10664 = vmatprep.mubr.f32.mxu0 0.0
  %10665 = vmatmul.mubr.f32.gmra.mxu0 %v10282
  %v10666 = vpop.f32.mrf.mxu0
  %v10667 = vadd.f32 0.0, %v10666
  %v10668 = vpop.f32.mrf.mxu0
  %10669 = vmatprep.mubr.f32.mxu0 0.0
  %10670 = vmatmul.mubr.f32.gmra.mxu0 %v10285
  %v10671 = vpop.f32.mrf.mxu0
  %v10672 = vadd.f32 0.0, %v10671
  %v10673 = vpop.f32.mrf.mxu0
  %10674 = vdwg.mxu0
  %v10675 = vadd.f32 %v9965, %v10357
  %v10676 = vadd.f32 %v9966, %v10362
  %v10677 = vadd.f32 %v9967, %v10367
  %v10678 = vadd.f32 %v9968, %v10372
  %v10679 = vadd.f32 %v9969, %v10377
  %v10680 = vadd.f32 %v9970, %v10382
  %v10681 = vadd.f32 %v9971, %v10387
  %v10682 = vadd.f32 %v9972, %v10392
  %v10683 = vadd.f32 %v9973, %v10397
  %v10684 = vadd.f32 %v9974, %v10402
  %v10685 = vadd.f32 %v9975, %v10407
  %v10686 = vadd.f32 %v9976, %v10412
  %v10687 = vadd.f32 %v9977, %v10417
  %v10688 = vadd.f32 %v9978, %v10422
  %v10689 = vadd.f32 %v9979, %v10427
  %v10690 = vadd.f32 %v9980, %v10432
  %v10691 = vadd.f32 %v9981, %v10437
  %v10692 = vadd.f32 %v9982, %v10442
  %v10693 = vadd.f32 %v9983, %v10447
  %v10694 = vadd.f32 %v9984, %v10452
  %v10695 = vadd.f32 %v9985, %v10457
  %v10696 = vadd.f32 %v9986, %v10462
  %v10697 = vadd.f32 %v9987, %v10467
  %v10698 = vadd.f32 %v9988, %v10472
  %v10699 = vadd.f32 %v9989, %v10477
  %v10700 = vadd.f32 %v9990, %v10482
  %v10701 = vadd.f32 %v9991, %v10487
  %v10702 = vadd.f32 %v9992, %v10492
  %v10703 = vadd.f32 %v9993, %v10497
  %v10704 = vadd.f32 %v9994, %v10502
  %v10705 = vadd.f32 %v9995, %v10507
  %v10706 = vadd.f32 %v9996, %v10512
  %v10707 = vadd.f32 %v9997, %v10517
  %v10708 = vadd.f32 %v9998, %v10522
  %v10709 = vadd.f32 %v9999, %v10527
  %v10710 = vadd.f32 %v10000, %v10532
  %v10711 = vadd.f32 %v10001, %v10537
  %v10712 = vadd.f32 %v10002, %v10542
  %v10713 = vadd.f32 %v10003, %v10547
  %v10714 = vadd.f32 %v10004, %v10552
  %v10715 = vadd.f32 %v10005, %v10557
  %v10716 = vadd.f32 %v10006, %v10562
  %v10717 = vadd.f32 %v10007, %v10567
  %v10718 = vadd.f32 %v10008, %v10572
  %v10719 = vadd.f32 %v10009, %v10577
  %v10720 = vadd.f32 %v10010, %v10582
  %v10721 = vadd.f32 %v10011, %v10587
  %v10722 = vadd.f32 %v10012, %v10592
  %v10723 = vadd.f32 %v10013, %v10597
  %v10724 = vadd.f32 %v10014, %v10602
  %v10725 = vadd.f32 %v10015, %v10607
  %v10726 = vadd.f32 %v10016, %v10612
  %v10727 = vadd.f32 %v10017, %v10617
  %v10728 = vadd.f32 %v10018, %v10622
  %v10729 = vadd.f32 %v10019, %v10627
  %v10730 = vadd.f32 %v10020, %v10632
  %v10731 = vadd.f32 %v10021, %v10637
  %v10732 = vadd.f32 %v10022, %v10642
  %v10733 = vadd.f32 %v10023, %v10647
  %v10734 = vadd.f32 %v10024, %v10652
  %v10735 = vadd.f32 %v10025, %v10657
  %v10736 = vadd.f32 %v10026, %v10662
  %v10737 = vadd.f32 %v10027, %v10667
  %v10738 = vadd.f32 %v10028, %v10672
  %v10739 = vld [vmem:[%s78 + $0x2] sm:$0xff]
  %v10740 = vld [vmem:[%s78 + $0xa] sm:$0xff]
  %v10741 = vld [vmem:[%s78 + $0x1a] sm:$0xff]
  %v10742 = vld [vmem:[%s78 + $0x22] sm:$0xff]
  %v10743 = vld [vmem:[%s78 + $0x32] sm:$0xff]
  %v10744 = vld [vmem:[%s78 + $0x3a] sm:$0xff]
  %v10745 = vld [vmem:[%s78 + $0x4a] sm:$0xff]
  %v10746 = vld [vmem:[%s78 + $0x52] sm:$0xff]
  %v10747 = vld [vmem:[%s78 + $0x62] sm:$0xff]
  %v10748 = vld [vmem:[%s78 + $0x6a] sm:$0xff]
  %v10749 = vld [vmem:[%s78 + $0x7a] sm:$0xff]
  %v10750 = vld [vmem:[%s78 + $0x82] sm:$0xff]
  %v10751 = vld [vmem:[%s78 + $0x92] sm:$0xff]
  %v10752 = vld [vmem:[%s78 + $0x9a] sm:$0xff]
  %v10753 = vld [vmem:[%s78 + $0xaa] sm:$0xff]
  %v10754 = vld [vmem:[%s78 + $0xb2] sm:$0xff]
  %v10755 = vld [vmem:[%s78 + $0xc2] sm:$0xff]
  %v10756 = vld [vmem:[%s78 + $0xca] sm:$0xff]
  %v10757 = vld [vmem:[%s78 + $0xda] sm:$0xff]
  %v10758 = vld [vmem:[%s78 + $0xe2] sm:$0xff]
  %v10759 = vld [vmem:[%s78 + $0xf2] sm:$0xff]
  %v10760 = vld [vmem:[%s78 + $0xfa] sm:$0xff]
  %v10761 = vld [vmem:[%s78 + $0x10a] sm:$0xff]
  %v10762 = vld [vmem:[%s78 + $0x112] sm:$0xff]
  %v10763 = vld [vmem:[%s78 + $0x122] sm:$0xff]
  %v10764 = vld [vmem:[%s78 + $0x12a] sm:$0xff]
  %v10765 = vld [vmem:[%s78 + $0x13a] sm:$0xff]
  %v10766 = vld [vmem:[%s78 + $0x142] sm:$0xff]
  %v10767 = vld [vmem:[%s78 + $0x152] sm:$0xff]
  %v10768 = vld [vmem:[%s78 + $0x15a] sm:$0xff]
  %v10769 = vld [vmem:[%s78 + $0x16a] sm:$0xff]
  %v10770 = vld [vmem:[%s78 + $0x172] sm:$0xff]
  %v10771 = vld [vmem:[%s78 + $0x1b2] sm:$0xff]
  %v10772 = vld [vmem:[%s78 + $0x1ba] sm:$0xff]
  %v10773 = vld [vmem:[%s78 + $0x1ca] sm:$0xff]
  %v10774 = vld [vmem:[%s78 + $0x1d2] sm:$0xff]
  %v10775 = vld [vmem:[%s78 + $0x1e2] sm:$0xff]
  %v10776 = vld [vmem:[%s78 + $0x1ea] sm:$0xff]
  %v10777 = vld [vmem:[%s78 + $0x1fa] sm:$0xff]
  %v10778 = vld [vmem:[%s78 + $0x202] sm:$0xff]
  %v10779 = vld [vmem:[%s78 + $0x212] sm:$0xff]
  %v10780 = vld [vmem:[%s78 + $0x21a] sm:$0xff]
  %v10781 = vld [vmem:[%s78 + $0x22a] sm:$0xff]
  %v10782 = vld [vmem:[%s78 + $0x232] sm:$0xff]
  %v10783 = vld [vmem:[%s78 + $0x242] sm:$0xff]
  %v10784 = vld [vmem:[%s78 + $0x24a] sm:$0xff]
  %v10785 = vld [vmem:[%s78 + $0x25a] sm:$0xff]
  %v10786 = vld [vmem:[%s78 + $0x262] sm:$0xff]
  %v10787 = vld [vmem:[%s78 + $0x272] sm:$0xff]
  %v10788 = vld [vmem:[%s78 + $0x27a] sm:$0xff]
  %v10789 = vld [vmem:[%s78 + $0x28a] sm:$0xff]
  %v10790 = vld [vmem:[%s78 + $0x292] sm:$0xff]
  %v10791 = vld [vmem:[%s78 + $0x2a2] sm:$0xff]
  %v10792 = vld [vmem:[%s78 + $0x2aa] sm:$0xff]
  %v10793 = vld [vmem:[%s78 + $0x2ba] sm:$0xff]
  %v10794 = vld [vmem:[%s78 + $0x2c2] sm:$0xff]
  %v10795 = vld [vmem:[%s78 + $0x2d2] sm:$0xff]
  %v10796 = vld [vmem:[%s78 + $0x2da] sm:$0xff]
  %v10797 = vld [vmem:[%s78 + $0x2ea] sm:$0xff]
  %v10798 = vld [vmem:[%s78 + $0x2f2] sm:$0xff]
  %v10799 = vld [vmem:[%s78 + $0x302] sm:$0xff]
  %v10800 = vld [vmem:[%s78 + $0x30a] sm:$0xff]
  %v10801 = vld [vmem:[%s78 + $0x31a] sm:$0xff]
  %v10802 = vld [vmem:[%s78 + $0x322] sm:$0xff]
  %s10803 = scalar_lea.vmem %s2, 20
  %v10804 = vld [vmem:[%s10803] sm:$0xf]
  %v10806 = vsel %vm79, %v10739, 0
  %v10809 = vsel %vm79, %v10740, 0
  %v10812 = vsel %vm79, %v10741, 0
  %v10815 = vsel %vm79, %v10742, 0
  %v10818 = vsel %vm79, %v10743, 0
  %v10821 = vsel %vm79, %v10744, 0
  %v10824 = vsel %vm79, %v10745, 0
  %v10827 = vsel %vm79, %v10746, 0
  %v10830 = vsel %vm79, %v10747, 0
  %v10833 = vsel %vm79, %v10748, 0
  %v10836 = vsel %vm79, %v10749, 0
  %v10839 = vsel %vm79, %v10750, 0
  %v10842 = vsel %vm79, %v10751, 0
  %v10845 = vsel %vm79, %v10752, 0
  %v10848 = vsel %vm79, %v10753, 0
  %v10851 = vsel %vm79, %v10754, 0
  %v10854 = vsel %vm79, %v10755, 0
  %v10857 = vsel %vm79, %v10756, 0
  %v10860 = vsel %vm79, %v10757, 0
  %v10863 = vsel %vm79, %v10758, 0
  %v10866 = vsel %vm79, %v10759, 0
  %v10869 = vsel %vm79, %v10760, 0
  %v10872 = vsel %vm79, %v10761, 0
  %v10875 = vsel %vm79, %v10762, 0
  %v10878 = vsel %vm79, %v10763, 0
  %v10881 = vsel %vm79, %v10764, 0
  %v10884 = vsel %vm79, %v10765, 0
  %v10887 = vsel %vm79, %v10766, 0
  %v10890 = vsel %vm79, %v10767, 0
  %v10893 = vsel %vm79, %v10768, 0
  %v10896 = vsel %vm79, %v10769, 0
  %v10899 = vsel %vm79, %v10770, 0
  %v10902 = vsel %vm79, %v10771, 0
  %v10905 = vsel %vm79, %v10772, 0
  %v10908 = vsel %vm79, %v10773, 0
  %v10911 = vsel %vm79, %v10774, 0
  %v10914 = vsel %vm79, %v10775, 0
  %v10917 = vsel %vm79, %v10776, 0
  %v10920 = vsel %vm79, %v10777, 0
  %v10923 = vsel %vm79, %v10778, 0
  %v10926 = vsel %vm79, %v10779, 0
  %v10929 = vsel %vm79, %v10780, 0
  %v10932 = vsel %vm79, %v10781, 0
  %v10935 = vsel %vm79, %v10782, 0
  %v10938 = vsel %vm79, %v10783, 0
  %v10941 = vsel %vm79, %v10784, 0
  %v10944 = vsel %vm79, %v10785, 0
  %v10947 = vsel %vm79, %v10786, 0
  %v10950 = vsel %vm79, %v10787, 0
  %v10953 = vsel %vm79, %v10788, 0
  %v10956 = vsel %vm79, %v10789, 0
  %v10959 = vsel %vm79, %v10790, 0
  %v10962 = vsel %vm79, %v10791, 0
  %v10965 = vsel %vm79, %v10792, 0
  %v10968 = vsel %vm79, %v10793, 0
  %v10971 = vsel %vm79, %v10794, 0
  %v10974 = vsel %vm79, %v10795, 0
  %v10977 = vsel %vm79, %v10796, 0
  %v10980 = vsel %vm79, %v10797, 0
  %v10983 = vsel %vm79, %v10798, 0
  %v10986 = vsel %vm79, %v10799, 0
  %v10989 = vsel %vm79, %v10800, 0
  %v10992 = vsel %vm79, %v10801, 0
  %v10995 = vsel %vm79, %v10802, 0
  %v10998 = vsel %vm621, %v10804, 0
  %11000 = vmatprep.subr.mxu0 0.0
  %11001 = vmatpush1.msra.mxu0 0.0
  %11002 = vmatprep.subr.mxu0 0.0
  %11003 = vmatpush1.msra.mxu0 0.0
  %11004 = vmatprep.subr.mxu0 0.0
  %11005 = vmatpush1.msra.mxu0 0.0
  %11006 = vmatprep.subr.mxu0 0.0
  %11007 = vmatpush1.msra.mxu0 0.0
  %11008 = vmatprep.subr.mxu0 0.0
  %11009 = vmatpush1.msra.mxu0 0.0
  %11010 = vmatprep.subr.mxu0 0.0
  %11011 = vmatpush1.msra.mxu0 0.0
  %11012 = vmatprep.subr.mxu0 0.0
  %11013 = vmatpush1.msra.mxu0 0.0
  %11014 = vmatprep.subr.mxu0 0.0
  %11015 = vmatpush1.msra.mxu0 0.0
  %11016 = vmatprep.subr.mxu0 0.0
  %11017 = vmatpush1.msra.mxu0 0.0
  %11018 = vmatprep.subr.mxu0 0.0
  %11019 = vmatpush1.msra.mxu0 0.0
  %11020 = vmatprep.subr.mxu0 0.0
  %11021 = vmatpush1.msra.mxu0 0.0
  %11022 = vmatprep.subr.mxu0 0.0
  %11023 = vmatpush1.msra.mxu0 0.0
  %11024 = vmatprep.subr.mxu0 0.0
  %11025 = vmatpush1.msra.mxu0 0.0
  %11026 = vmatprep.subr.mxu0 0.0
  %11027 = vmatpush1.msra.mxu0 0.0
  %11028 = vmatprep.subr.mxu0 0.0
  %11029 = vmatpush1.msra.mxu0 0.0
  %11030 = vmatprep.subr.mxu0 0.0
  %11031 = vmatpush1.msra.mxu0 %v10998
  %11032 = vmatprep.subr.mxu0 0.0
  %11033 = vmatpush2.msra.mxu0 0.0
  %11034 = vmatprep.subr.mxu0 0.0
  %11035 = vmatpush2.msra.mxu0 0.0
  %11036 = vmatprep.subr.mxu0 0.0
  %11037 = vmatpush2.msra.mxu0 0.0
  %11038 = vmatprep.subr.mxu0 0.0
  %11039 = vmatpush2.msra.mxu0 0.0
  %11040 = vmatprep.subr.mxu0 0.0
  %11041 = vmatpush2.msra.mxu0 0.0
  %11042 = vmatprep.subr.mxu0 0.0
  %11043 = vmatpush2.msra.mxu0 0.0
  %11044 = vmatprep.subr.mxu0 0.0
  %11045 = vmatpush2.msra.mxu0 0.0
  %11046 = vmatprep.subr.mxu0 0.0
  %11047 = vmatpush2.msra.mxu0 0.0
  %11048 = vmatprep.subr.mxu0 0.0
  %11049 = vmatpush2.msra.mxu0 0.0
  %11050 = vmatprep.subr.mxu0 0.0
  %11051 = vmatpush2.msra.mxu0 0.0
  %11052 = vmatprep.subr.mxu0 0.0
  %11053 = vmatpush2.msra.mxu0 0.0
  %11054 = vmatprep.subr.mxu0 0.0
  %11055 = vmatpush2.msra.mxu0 0.0
  %11056 = vmatprep.subr.mxu0 0.0
  %11057 = vmatpush2.msra.mxu0 0.0
  %11058 = vmatprep.subr.mxu0 0.0
  %11059 = vmatpush2.msra.mxu0 0.0
  %11060 = vmatprep.subr.mxu0 0.0
  %11061 = vmatpush2.msra.mxu0 0.0
  %11062 = vmatprep.subr.mxu0 0.0
  %11063 = vmatpush2.msra.mxu0 0.0
  %11064 = vmatprep.mubr.f32.mxu0 0.0
  %11065 = vmatmul.mubr.f32.gmra.mxu0 %v10806
  %v11066 = vpop.f32.mrf.mxu0
  %v11067 = vadd.f32 0.0, %v11066
  %v11068 = vpop.f32.mrf.mxu0
  %11069 = vmatprep.mubr.f32.mxu0 0.0
  %11070 = vmatmul.mubr.f32.gmra.mxu0 %v10809
  %v11071 = vpop.f32.mrf.mxu0
  %v11072 = vadd.f32 0.0, %v11071
  %v11073 = vpop.f32.mrf.mxu0
  %11074 = vmatprep.mubr.f32.mxu0 0.0
  %11075 = vmatmul.mubr.f32.gmra.mxu0 %v10812
  %v11076 = vpop.f32.mrf.mxu0
  %v11077 = vadd.f32 0.0, %v11076
  %v11078 = vpop.f32.mrf.mxu0
  %11079 = vmatprep.mubr.f32.mxu0 0.0
  %11080 = vmatmul.mubr.f32.gmra.mxu0 %v10815
  %v11081 = vpop.f32.mrf.mxu0
  %v11082 = vadd.f32 0.0, %v11081
  %v11083 = vpop.f32.mrf.mxu0
  %11084 = vmatprep.mubr.f32.mxu0 0.0
  %11085 = vmatmul.mubr.f32.gmra.mxu0 %v10818
  %v11086 = vpop.f32.mrf.mxu0
  %v11087 = vadd.f32 0.0, %v11086
  %v11088 = vpop.f32.mrf.mxu0
  %11089 = vmatprep.mubr.f32.mxu0 0.0
  %11090 = vmatmul.mubr.f32.gmra.mxu0 %v10821
  %v11091 = vpop.f32.mrf.mxu0
  %v11092 = vadd.f32 0.0, %v11091
  %v11093 = vpop.f32.mrf.mxu0
  %11094 = vmatprep.mubr.f32.mxu0 0.0
  %11095 = vmatmul.mubr.f32.gmra.mxu0 %v10824
  %v11096 = vpop.f32.mrf.mxu0
  %v11097 = vadd.f32 0.0, %v11096
  %v11098 = vpop.f32.mrf.mxu0
  %11099 = vmatprep.mubr.f32.mxu0 0.0
  %11100 = vmatmul.mubr.f32.gmra.mxu0 %v10827
  %v11101 = vpop.f32.mrf.mxu0
  %v11102 = vadd.f32 0.0, %v11101
  %v11103 = vpop.f32.mrf.mxu0
  %11104 = vmatprep.mubr.f32.mxu0 0.0
  %11105 = vmatmul.mubr.f32.gmra.mxu0 %v10830
  %v11106 = vpop.f32.mrf.mxu0
  %v11107 = vadd.f32 0.0, %v11106
  %v11108 = vpop.f32.mrf.mxu0
  %11109 = vmatprep.mubr.f32.mxu0 0.0
  %11110 = vmatmul.mubr.f32.gmra.mxu0 %v10833
  %v11111 = vpop.f32.mrf.mxu0
  %v11112 = vadd.f32 0.0, %v11111
  %v11113 = vpop.f32.mrf.mxu0
  %11114 = vmatprep.mubr.f32.mxu0 0.0
  %11115 = vmatmul.mubr.f32.gmra.mxu0 %v10836
  %v11116 = vpop.f32.mrf.mxu0
  %v11117 = vadd.f32 0.0, %v11116
  %v11118 = vpop.f32.mrf.mxu0
  %11119 = vmatprep.mubr.f32.mxu0 0.0
  %11120 = vmatmul.mubr.f32.gmra.mxu0 %v10839
  %v11121 = vpop.f32.mrf.mxu0
  %v11122 = vadd.f32 0.0, %v11121
  %v11123 = vpop.f32.mrf.mxu0
  %11124 = vmatprep.mubr.f32.mxu0 0.0
  %11125 = vmatmul.mubr.f32.gmra.mxu0 %v10842
  %v11126 = vpop.f32.mrf.mxu0
  %v11127 = vadd.f32 0.0, %v11126
  %v11128 = vpop.f32.mrf.mxu0
  %11129 = vmatprep.mubr.f32.mxu0 0.0
  %11130 = vmatmul.mubr.f32.gmra.mxu0 %v10845
  %v11131 = vpop.f32.mrf.mxu0
  %v11132 = vadd.f32 0.0, %v11131
  %v11133 = vpop.f32.mrf.mxu0
  %11134 = vmatprep.mubr.f32.mxu0 0.0
  %11135 = vmatmul.mubr.f32.gmra.mxu0 %v10848
  %v11136 = vpop.f32.mrf.mxu0
  %v11137 = vadd.f32 0.0, %v11136
  %v11138 = vpop.f32.mrf.mxu0
  %11139 = vmatprep.mubr.f32.mxu0 0.0
  %11140 = vmatmul.mubr.f32.gmra.mxu0 %v10851
  %v11141 = vpop.f32.mrf.mxu0
  %v11142 = vadd.f32 0.0, %v11141
  %v11143 = vpop.f32.mrf.mxu0
  %11144 = vmatprep.mubr.f32.mxu0 0.0
  %11145 = vmatmul.mubr.f32.gmra.mxu0 %v10854
  %v11146 = vpop.f32.mrf.mxu0
  %v11147 = vadd.f32 0.0, %v11146
  %v11148 = vpop.f32.mrf.mxu0
  %11149 = vmatprep.mubr.f32.mxu0 0.0
  %11150 = vmatmul.mubr.f32.gmra.mxu0 %v10857
  %v11151 = vpop.f32.mrf.mxu0
  %v11152 = vadd.f32 0.0, %v11151
  %v11153 = vpop.f32.mrf.mxu0
  %11154 = vmatprep.mubr.f32.mxu0 0.0
  %11155 = vmatmul.mubr.f32.gmra.mxu0 %v10860
  %v11156 = vpop.f32.mrf.mxu0
  %v11157 = vadd.f32 0.0, %v11156
  %v11158 = vpop.f32.mrf.mxu0
  %11159 = vmatprep.mubr.f32.mxu0 0.0
  %11160 = vmatmul.mubr.f32.gmra.mxu0 %v10863
  %v11161 = vpop.f32.mrf.mxu0
  %v11162 = vadd.f32 0.0, %v11161
  %v11163 = vpop.f32.mrf.mxu0
  %11164 = vmatprep.mubr.f32.mxu0 0.0
  %11165 = vmatmul.mubr.f32.gmra.mxu0 %v10866
  %v11166 = vpop.f32.mrf.mxu0
  %v11167 = vadd.f32 0.0, %v11166
  %v11168 = vpop.f32.mrf.mxu0
  %11169 = vmatprep.mubr.f32.mxu0 0.0
  %11170 = vmatmul.mubr.f32.gmra.mxu0 %v10869
  %v11171 = vpop.f32.mrf.mxu0
  %v11172 = vadd.f32 0.0, %v11171
  %v11173 = vpop.f32.mrf.mxu0
  %11174 = vmatprep.mubr.f32.mxu0 0.0
  %11175 = vmatmul.mubr.f32.gmra.mxu0 %v10872
  %v11176 = vpop.f32.mrf.mxu0
  %v11177 = vadd.f32 0.0, %v11176
  %v11178 = vpop.f32.mrf.mxu0
  %11179 = vmatprep.mubr.f32.mxu0 0.0
  %11180 = vmatmul.mubr.f32.gmra.mxu0 %v10875
  %v11181 = vpop.f32.mrf.mxu0
  %v11182 = vadd.f32 0.0, %v11181
  %v11183 = vpop.f32.mrf.mxu0
  %11184 = vmatprep.mubr.f32.mxu0 0.0
  %11185 = vmatmul.mubr.f32.gmra.mxu0 %v10878
  %v11186 = vpop.f32.mrf.mxu0
  %v11187 = vadd.f32 0.0, %v11186
  %v11188 = vpop.f32.mrf.mxu0
  %11189 = vmatprep.mubr.f32.mxu0 0.0
  %11190 = vmatmul.mubr.f32.gmra.mxu0 %v10881
  %v11191 = vpop.f32.mrf.mxu0
  %v11192 = vadd.f32 0.0, %v11191
  %v11193 = vpop.f32.mrf.mxu0
  %11194 = vmatprep.mubr.f32.mxu0 0.0
  %11195 = vmatmul.mubr.f32.gmra.mxu0 %v10884
  %v11196 = vpop.f32.mrf.mxu0
  %v11197 = vadd.f32 0.0, %v11196
  %v11198 = vpop.f32.mrf.mxu0
  %11199 = vmatprep.mubr.f32.mxu0 0.0
  %11200 = vmatmul.mubr.f32.gmra.mxu0 %v10887
  %v11201 = vpop.f32.mrf.mxu0
  %v11202 = vadd.f32 0.0, %v11201
  %v11203 = vpop.f32.mrf.mxu0
  %11204 = vmatprep.mubr.f32.mxu0 0.0
  %11205 = vmatmul.mubr.f32.gmra.mxu0 %v10890
  %v11206 = vpop.f32.mrf.mxu0
  %v11207 = vadd.f32 0.0, %v11206
  %v11208 = vpop.f32.mrf.mxu0
  %11209 = vmatprep.mubr.f32.mxu0 0.0
  %11210 = vmatmul.mubr.f32.gmra.mxu0 %v10893
  %v11211 = vpop.f32.mrf.mxu0
  %v11212 = vadd.f32 0.0, %v11211
  %v11213 = vpop.f32.mrf.mxu0
  %11214 = vmatprep.mubr.f32.mxu0 0.0
  %11215 = vmatmul.mubr.f32.gmra.mxu0 %v10896
  %v11216 = vpop.f32.mrf.mxu0
  %v11217 = vadd.f32 0.0, %v11216
  %v11218 = vpop.f32.mrf.mxu0
  %11219 = vmatprep.mubr.f32.mxu0 0.0
  %11220 = vmatmul.mubr.f32.gmra.mxu0 %v10899
  %v11221 = vpop.f32.mrf.mxu0
  %v11222 = vadd.f32 0.0, %v11221
  %v11223 = vpop.f32.mrf.mxu0
  %11224 = vmatprep.mubr.f32.mxu0 0.0
  %11225 = vmatmul.mubr.f32.gmra.mxu0 %v10902
  %v11226 = vpop.f32.mrf.mxu0
  %v11227 = vadd.f32 0.0, %v11226
  %v11228 = vpop.f32.mrf.mxu0
  %11229 = vmatprep.mubr.f32.mxu0 0.0
  %11230 = vmatmul.mubr.f32.gmra.mxu0 %v10905
  %v11231 = vpop.f32.mrf.mxu0
  %v11232 = vadd.f32 0.0, %v11231
  %v11233 = vpop.f32.mrf.mxu0
  %11234 = vmatprep.mubr.f32.mxu0 0.0
  %11235 = vmatmul.mubr.f32.gmra.mxu0 %v10908
  %v11236 = vpop.f32.mrf.mxu0
  %v11237 = vadd.f32 0.0, %v11236
  %v11238 = vpop.f32.mrf.mxu0
  %11239 = vmatprep.mubr.f32.mxu0 0.0
  %11240 = vmatmul.mubr.f32.gmra.mxu0 %v10911
  %v11241 = vpop.f32.mrf.mxu0
  %v11242 = vadd.f32 0.0, %v11241
  %v11243 = vpop.f32.mrf.mxu0
  %11244 = vmatprep.mubr.f32.mxu0 0.0
  %11245 = vmatmul.mubr.f32.gmra.mxu0 %v10914
  %v11246 = vpop.f32.mrf.mxu0
  %v11247 = vadd.f32 0.0, %v11246
  %v11248 = vpop.f32.mrf.mxu0
  %11249 = vmatprep.mubr.f32.mxu0 0.0
  %11250 = vmatmul.mubr.f32.gmra.mxu0 %v10917
  %v11251 = vpop.f32.mrf.mxu0
  %v11252 = vadd.f32 0.0, %v11251
  %v11253 = vpop.f32.mrf.mxu0
  %11254 = vmatprep.mubr.f32.mxu0 0.0
  %11255 = vmatmul.mubr.f32.gmra.mxu0 %v10920
  %v11256 = vpop.f32.mrf.mxu0
  %v11257 = vadd.f32 0.0, %v11256
  %v11258 = vpop.f32.mrf.mxu0
  %11259 = vmatprep.mubr.f32.mxu0 0.0
  %11260 = vmatmul.mubr.f32.gmra.mxu0 %v10923
  %v11261 = vpop.f32.mrf.mxu0
  %v11262 = vadd.f32 0.0, %v11261
  %v11263 = vpop.f32.mrf.mxu0
  %11264 = vmatprep.mubr.f32.mxu0 0.0
  %11265 = vmatmul.mubr.f32.gmra.mxu0 %v10926
  %v11266 = vpop.f32.mrf.mxu0
  %v11267 = vadd.f32 0.0, %v11266
  %v11268 = vpop.f32.mrf.mxu0
  %11269 = vmatprep.mubr.f32.mxu0 0.0
  %11270 = vmatmul.mubr.f32.gmra.mxu0 %v10929
  %v11271 = vpop.f32.mrf.mxu0
  %v11272 = vadd.f32 0.0, %v11271
  %v11273 = vpop.f32.mrf.mxu0
  %11274 = vmatprep.mubr.f32.mxu0 0.0
  %11275 = vmatmul.mubr.f32.gmra.mxu0 %v10932
  %v11276 = vpop.f32.mrf.mxu0
  %v11277 = vadd.f32 0.0, %v11276
  %v11278 = vpop.f32.mrf.mxu0
  %11279 = vmatprep.mubr.f32.mxu0 0.0
  %11280 = vmatmul.mubr.f32.gmra.mxu0 %v10935
  %v11281 = vpop.f32.mrf.mxu0
  %v11282 = vadd.f32 0.0, %v11281
  %v11283 = vpop.f32.mrf.mxu0
  %11284 = vmatprep.mubr.f32.mxu0 0.0
  %11285 = vmatmul.mubr.f32.gmra.mxu0 %v10938
  %v11286 = vpop.f32.mrf.mxu0
  %v11287 = vadd.f32 0.0, %v11286
  %v11288 = vpop.f32.mrf.mxu0
  %11289 = vmatprep.mubr.f32.mxu0 0.0
  %11290 = vmatmul.mubr.f32.gmra.mxu0 %v10941
  %v11291 = vpop.f32.mrf.mxu0
  %v11292 = vadd.f32 0.0, %v11291
  %v11293 = vpop.f32.mrf.mxu0
  %11294 = vmatprep.mubr.f32.mxu0 0.0
  %11295 = vmatmul.mubr.f32.gmra.mxu0 %v10944
  %v11296 = vpop.f32.mrf.mxu0
  %v11297 = vadd.f32 0.0, %v11296
  %v11298 = vpop.f32.mrf.mxu0
  %11299 = vmatprep.mubr.f32.mxu0 0.0
  %11300 = vmatmul.mubr.f32.gmra.mxu0 %v10947
  %v11301 = vpop.f32.mrf.mxu0
  %v11302 = vadd.f32 0.0, %v11301
  %v11303 = vpop.f32.mrf.mxu0
  %11304 = vmatprep.mubr.f32.mxu0 0.0
  %11305 = vmatmul.mubr.f32.gmra.mxu0 %v10950
  %v11306 = vpop.f32.mrf.mxu0
  %v11307 = vadd.f32 0.0, %v11306
  %v11308 = vpop.f32.mrf.mxu0
  %11309 = vmatprep.mubr.f32.mxu0 0.0
  %11310 = vmatmul.mubr.f32.gmra.mxu0 %v10953
  %v11311 = vpop.f32.mrf.mxu0
  %v11312 = vadd.f32 0.0, %v11311
  %v11313 = vpop.f32.mrf.mxu0
  %11314 = vmatprep.mubr.f32.mxu0 0.0
  %11315 = vmatmul.mubr.f32.gmra.mxu0 %v10956
  %v11316 = vpop.f32.mrf.mxu0
  %v11317 = vadd.f32 0.0, %v11316
  %v11318 = vpop.f32.mrf.mxu0
  %11319 = vmatprep.mubr.f32.mxu0 0.0
  %11320 = vmatmul.mubr.f32.gmra.mxu0 %v10959
  %v11321 = vpop.f32.mrf.mxu0
  %v11322 = vadd.f32 0.0, %v11321
  %v11323 = vpop.f32.mrf.mxu0
  %11324 = vmatprep.mubr.f32.mxu0 0.0
  %11325 = vmatmul.mubr.f32.gmra.mxu0 %v10962
  %v11326 = vpop.f32.mrf.mxu0
  %v11327 = vadd.f32 0.0, %v11326
  %v11328 = vpop.f32.mrf.mxu0
  %11329 = vmatprep.mubr.f32.mxu0 0.0
  %11330 = vmatmul.mubr.f32.gmra.mxu0 %v10965
  %v11331 = vpop.f32.mrf.mxu0
  %v11332 = vadd.f32 0.0, %v11331
  %v11333 = vpop.f32.mrf.mxu0
  %11334 = vmatprep.mubr.f32.mxu0 0.0
  %11335 = vmatmul.mubr.f32.gmra.mxu0 %v10968
  %v11336 = vpop.f32.mrf.mxu0
  %v11337 = vadd.f32 0.0, %v11336
  %v11338 = vpop.f32.mrf.mxu0
  %11339 = vmatprep.mubr.f32.mxu0 0.0
  %11340 = vmatmul.mubr.f32.gmra.mxu0 %v10971
  %v11341 = vpop.f32.mrf.mxu0
  %v11342 = vadd.f32 0.0, %v11341
  %v11343 = vpop.f32.mrf.mxu0
  %11344 = vmatprep.mubr.f32.mxu0 0.0
  %11345 = vmatmul.mubr.f32.gmra.mxu0 %v10974
  %v11346 = vpop.f32.mrf.mxu0
  %v11347 = vadd.f32 0.0, %v11346
  %v11348 = vpop.f32.mrf.mxu0
  %11349 = vmatprep.mubr.f32.mxu0 0.0
  %11350 = vmatmul.mubr.f32.gmra.mxu0 %v10977
  %v11351 = vpop.f32.mrf.mxu0
  %v11352 = vadd.f32 0.0, %v11351
  %v11353 = vpop.f32.mrf.mxu0
  %11354 = vmatprep.mubr.f32.mxu0 0.0
  %11355 = vmatmul.mubr.f32.gmra.mxu0 %v10980
  %v11356 = vpop.f32.mrf.mxu0
  %v11357 = vadd.f32 0.0, %v11356
  %v11358 = vpop.f32.mrf.mxu0
  %11359 = vmatprep.mubr.f32.mxu0 0.0
  %11360 = vmatmul.mubr.f32.gmra.mxu0 %v10983
  %v11361 = vpop.f32.mrf.mxu0
  %v11362 = vadd.f32 0.0, %v11361
  %v11363 = vpop.f32.mrf.mxu0
  %11364 = vmatprep.mubr.f32.mxu0 0.0
  %11365 = vmatmul.mubr.f32.gmra.mxu0 %v10986
  %v11366 = vpop.f32.mrf.mxu0
  %v11367 = vadd.f32 0.0, %v11366
  %v11368 = vpop.f32.mrf.mxu0
  %11369 = vmatprep.mubr.f32.mxu0 0.0
  %11370 = vmatmul.mubr.f32.gmra.mxu0 %v10989
  %v11371 = vpop.f32.mrf.mxu0
  %v11372 = vadd.f32 0.0, %v11371
  %v11373 = vpop.f32.mrf.mxu0
  %11374 = vmatprep.mubr.f32.mxu0 0.0
  %11375 = vmatmul.mubr.f32.gmra.mxu0 %v10992
  %v11376 = vpop.f32.mrf.mxu0
  %v11377 = vadd.f32 0.0, %v11376
  %v11378 = vpop.f32.mrf.mxu0
  %11379 = vmatprep.mubr.f32.mxu0 0.0
  %11380 = vmatmul.mubr.f32.gmra.mxu0 %v10995
  %v11381 = vpop.f32.mrf.mxu0
  %v11382 = vadd.f32 0.0, %v11381
  %v11383 = vpop.f32.mrf.mxu0
  %11384 = vdwg.mxu0
  %v11385 = vadd.f32 %v10675, %v11067
  %v11386 = vadd.f32 %v10676, %v11072
  %v11387 = vadd.f32 %v10677, %v11077
  %v11388 = vadd.f32 %v10678, %v11082
  %v11389 = vadd.f32 %v10679, %v11087
  %v11390 = vadd.f32 %v10680, %v11092
  %v11391 = vadd.f32 %v10681, %v11097
  %v11392 = vadd.f32 %v10682, %v11102
  %v11393 = vadd.f32 %v10683, %v11107
  %v11394 = vadd.f32 %v10684, %v11112
  %v11395 = vadd.f32 %v10685, %v11117
  %v11396 = vadd.f32 %v10686, %v11122
  %v11397 = vadd.f32 %v10687, %v11127
  %v11398 = vadd.f32 %v10688, %v11132
  %v11399 = vadd.f32 %v10689, %v11137
  %v11400 = vadd.f32 %v10690, %v11142
  %v11401 = vadd.f32 %v10691, %v11147
  %v11402 = vadd.f32 %v10692, %v11152
  %v11403 = vadd.f32 %v10693, %v11157
  %v11404 = vadd.f32 %v10694, %v11162
  %v11405 = vadd.f32 %v10695, %v11167
  %v11406 = vadd.f32 %v10696, %v11172
  %v11407 = vadd.f32 %v10697, %v11177
  %v11408 = vadd.f32 %v10698, %v11182
  %v11409 = vadd.f32 %v10699, %v11187
  %v11410 = vadd.f32 %v10700, %v11192
  %v11411 = vadd.f32 %v10701, %v11197
  %v11412 = vadd.f32 %v10702, %v11202
  %v11413 = vadd.f32 %v10703, %v11207
  %v11414 = vadd.f32 %v10704, %v11212
  %v11415 = vadd.f32 %v10705, %v11217
  %v11416 = vadd.f32 %v10706, %v11222
  %v11417 = vadd.f32 %v10707, %v11227
  %v11418 = vadd.f32 %v10708, %v11232
  %v11419 = vadd.f32 %v10709, %v11237
  %v11420 = vadd.f32 %v10710, %v11242
  %v11421 = vadd.f32 %v10711, %v11247
  %v11422 = vadd.f32 %v10712, %v11252
  %v11423 = vadd.f32 %v10713, %v11257
  %v11424 = vadd.f32 %v10714, %v11262
  %v11425 = vadd.f32 %v10715, %v11267
  %v11426 = vadd.f32 %v10716, %v11272
  %v11427 = vadd.f32 %v10717, %v11277
  %v11428 = vadd.f32 %v10718, %v11282
  %v11429 = vadd.f32 %v10719, %v11287
  %v11430 = vadd.f32 %v10720, %v11292
  %v11431 = vadd.f32 %v10721, %v11297
  %v11432 = vadd.f32 %v10722, %v11302
  %v11433 = vadd.f32 %v10723, %v11307
  %v11434 = vadd.f32 %v10724, %v11312
  %v11435 = vadd.f32 %v10725, %v11317
  %v11436 = vadd.f32 %v10726, %v11322
  %v11437 = vadd.f32 %v10727, %v11327
  %v11438 = vadd.f32 %v10728, %v11332
  %v11439 = vadd.f32 %v10729, %v11337
  %v11440 = vadd.f32 %v10730, %v11342
  %v11441 = vadd.f32 %v10731, %v11347
  %v11442 = vadd.f32 %v10732, %v11352
  %v11443 = vadd.f32 %v10733, %v11357
  %v11444 = vadd.f32 %v10734, %v11362
  %v11445 = vadd.f32 %v10735, %v11367
  %v11446 = vadd.f32 %v10736, %v11372
  %v11447 = vadd.f32 %v10737, %v11377
  %v11448 = vadd.f32 %v10738, %v11382
  %v11449 = vld [vmem:[%s4430] sm:$0xff]
  %v11450 = vld [vmem:[%s4430 + $0x8] sm:$0xff]
  %v11451 = vld [vmem:[%s4430 + $0x18] sm:$0xff]
  %v11452 = vld [vmem:[%s4430 + $0x20] sm:$0xff]
  %v11453 = vld [vmem:[%s4430 + $0x30] sm:$0xff]
  %v11454 = vld [vmem:[%s4430 + $0x38] sm:$0xff]
  %v11455 = vld [vmem:[%s4430 + $0x48] sm:$0xff]
  %v11456 = vld [vmem:[%s4430 + $0x50] sm:$0xff]
  %v11457 = vld [vmem:[%s4430 + $0x60] sm:$0xff]
  %v11458 = vld [vmem:[%s4430 + $0x68] sm:$0xff]
  %v11459 = vld [vmem:[%s4430 + $0x78] sm:$0xff]
  %v11460 = vld [vmem:[%s4430 + $0x80] sm:$0xff]
  %v11461 = vld [vmem:[%s4430 + $0x90] sm:$0xff]
  %v11462 = vld [vmem:[%s4430 + $0x98] sm:$0xff]
  %v11463 = vld [vmem:[%s4430 + $0xa8] sm:$0xff]
  %v11464 = vld [vmem:[%s4430 + $0xb0] sm:$0xff]
  %v11465 = vld [vmem:[%s4430 + $0xc0] sm:$0xff]
  %v11466 = vld [vmem:[%s4430 + $0xc8] sm:$0xff]
  %v11467 = vld [vmem:[%s4430 + $0xd8] sm:$0xff]
  %v11468 = vld [vmem:[%s4430 + $0xe0] sm:$0xff]
  %v11469 = vld [vmem:[%s4430 + $0xf0] sm:$0xff]
  %v11470 = vld [vmem:[%s4430 + $0xf8] sm:$0xff]
  %v11471 = vld [vmem:[%s4430 + $0x108] sm:$0xff]
  %v11472 = vld [vmem:[%s4430 + $0x110] sm:$0xff]
  %v11473 = vld [vmem:[%s4430 + $0x120] sm:$0xff]
  %v11474 = vld [vmem:[%s4430 + $0x128] sm:$0xff]
  %v11475 = vld [vmem:[%s4430 + $0x138] sm:$0xff]
  %v11476 = vld [vmem:[%s4430 + $0x140] sm:$0xff]
  %v11477 = vld [vmem:[%s4430 + $0x150] sm:$0xff]
  %v11478 = vld [vmem:[%s4430 + $0x158] sm:$0xff]
  %v11479 = vld [vmem:[%s4430 + $0x168] sm:$0xff]
  %v11480 = vld [vmem:[%s4430 + $0x170] sm:$0xff]
  %v11481 = vld [vmem:[%s4430 + $0x1b0] sm:$0xff]
  %v11482 = vld [vmem:[%s4430 + $0x1b8] sm:$0xff]
  %v11483 = vld [vmem:[%s4430 + $0x1c8] sm:$0xff]
  %v11484 = vld [vmem:[%s4430 + $0x1d0] sm:$0xff]
  %v11485 = vld [vmem:[%s4430 + $0x1e0] sm:$0xff]
  %v11486 = vld [vmem:[%s4430 + $0x1e8] sm:$0xff]
  %v11487 = vld [vmem:[%s4430 + $0x1f8] sm:$0xff]
  %v11488 = vld [vmem:[%s4430 + $0x200] sm:$0xff]
  %v11489 = vld [vmem:[%s4430 + $0x210] sm:$0xff]
  %v11490 = vld [vmem:[%s4430 + $0x218] sm:$0xff]
  %v11491 = vld [vmem:[%s4430 + $0x228] sm:$0xff]
  %v11492 = vld [vmem:[%s4430 + $0x230] sm:$0xff]
  %v11493 = vld [vmem:[%s4430 + $0x240] sm:$0xff]
  %v11494 = vld [vmem:[%s4430 + $0x248] sm:$0xff]
  %v11495 = vld [vmem:[%s4430 + $0x258] sm:$0xff]
  %v11496 = vld [vmem:[%s4430 + $0x260] sm:$0xff]
  %v11497 = vld [vmem:[%s4430 + $0x270] sm:$0xff]
  %v11498 = vld [vmem:[%s4430 + $0x278] sm:$0xff]
  %v11499 = vld [vmem:[%s4430 + $0x288] sm:$0xff]
  %v11500 = vld [vmem:[%s4430 + $0x290] sm:$0xff]
  %v11501 = vld [vmem:[%s4430 + $0x2a0] sm:$0xff]
  %v11502 = vld [vmem:[%s4430 + $0x2a8] sm:$0xff]
  %v11503 = vld [vmem:[%s4430 + $0x2b8] sm:$0xff]
  %v11504 = vld [vmem:[%s4430 + $0x2c0] sm:$0xff]
  %v11505 = vld [vmem:[%s4430 + $0x2d0] sm:$0xff]
  %v11506 = vld [vmem:[%s4430 + $0x2d8] sm:$0xff]
  %v11507 = vld [vmem:[%s4430 + $0x2e8] sm:$0xff]
  %v11508 = vld [vmem:[%s4430 + $0x2f0] sm:$0xff]
  %v11509 = vld [vmem:[%s4430 + $0x300] sm:$0xff]
  %v11510 = vld [vmem:[%s4430 + $0x308] sm:$0xff]
  %v11511 = vld [vmem:[%s4430 + $0x318] sm:$0xff]
  %v11512 = vld [vmem:[%s4430 + $0x320] sm:$0xff]
  %s11513 = scalar_lea.vmem %s2, 24
  %v11514 = vld [vmem:[%s11513] sm:$0xf]
  %v11516 = vsel %vm79, %v11449, 0
  %v11519 = vsel %vm79, %v11450, 0
  %v11522 = vsel %vm79, %v11451, 0
  %v11525 = vsel %vm79, %v11452, 0
  %v11528 = vsel %vm79, %v11453, 0
  %v11531 = vsel %vm79, %v11454, 0
  %v11534 = vsel %vm79, %v11455, 0
  %v11537 = vsel %vm79, %v11456, 0
  %v11540 = vsel %vm79, %v11457, 0
  %v11543 = vsel %vm79, %v11458, 0
  %v11546 = vsel %vm79, %v11459, 0
  %v11549 = vsel %vm79, %v11460, 0
  %v11552 = vsel %vm79, %v11461, 0
  %v11555 = vsel %vm79, %v11462, 0
  %v11558 = vsel %vm79, %v11463, 0
  %v11561 = vsel %vm79, %v11464, 0
  %v11564 = vsel %vm79, %v11465, 0
  %v11567 = vsel %vm79, %v11466, 0
  %v11570 = vsel %vm79, %v11467, 0
  %v11573 = vsel %vm79, %v11468, 0
  %v11576 = vsel %vm79, %v11469, 0
  %v11579 = vsel %vm79, %v11470, 0
  %v11582 = vsel %vm79, %v11471, 0
  %v11585 = vsel %vm79, %v11472, 0
  %v11588 = vsel %vm79, %v11473, 0
  %v11591 = vsel %vm79, %v11474, 0
  %v11594 = vsel %vm79, %v11475, 0
  %v11597 = vsel %vm79, %v11476, 0
  %v11600 = vsel %vm79, %v11477, 0
  %v11603 = vsel %vm79, %v11478, 0
  %v11606 = vsel %vm79, %v11479, 0
  %v11609 = vsel %vm79, %v11480, 0
  %v11612 = vsel %vm79, %v11481, 0
  %v11615 = vsel %vm79, %v11482, 0
  %v11618 = vsel %vm79, %v11483, 0
  %v11621 = vsel %vm79, %v11484, 0
  %v11624 = vsel %vm79, %v11485, 0
  %v11627 = vsel %vm79, %v11486, 0
  %v11630 = vsel %vm79, %v11487, 0
  %v11633 = vsel %vm79, %v11488, 0
  %v11636 = vsel %vm79, %v11489, 0
  %v11639 = vsel %vm79, %v11490, 0
  %v11642 = vsel %vm79, %v11491, 0
  %v11645 = vsel %vm79, %v11492, 0
  %v11648 = vsel %vm79, %v11493, 0
  %v11651 = vsel %vm79, %v11494, 0
  %v11654 = vsel %vm79, %v11495, 0
  %v11657 = vsel %vm79, %v11496, 0
  %v11660 = vsel %vm79, %v11497, 0
  %v11663 = vsel %vm79, %v11498, 0
  %v11666 = vsel %vm79, %v11499, 0
  %v11669 = vsel %vm79, %v11500, 0
  %v11672 = vsel %vm79, %v11501, 0
  %v11675 = vsel %vm79, %v11502, 0
  %v11678 = vsel %vm79, %v11503, 0
  %v11681 = vsel %vm79, %v11504, 0
  %v11684 = vsel %vm79, %v11505, 0
  %v11687 = vsel %vm79, %v11506, 0
  %v11690 = vsel %vm79, %v11507, 0
  %v11693 = vsel %vm79, %v11508, 0
  %v11696 = vsel %vm79, %v11509, 0
  %v11699 = vsel %vm79, %v11510, 0
  %v11702 = vsel %vm79, %v11511, 0
  %v11705 = vsel %vm79, %v11512, 0
  %v11708 = vsel %vm621, %v11514, 0
  %11710 = vmatprep.subr.mxu0 0.0
  %11711 = vmatpush1.msra.mxu0 0.0
  %11712 = vmatprep.subr.mxu0 0.0
  %11713 = vmatpush1.msra.mxu0 0.0
  %11714 = vmatprep.subr.mxu0 0.0
  %11715 = vmatpush1.msra.mxu0 0.0
  %11716 = vmatprep.subr.mxu0 0.0
  %11717 = vmatpush1.msra.mxu0 0.0
  %11718 = vmatprep.subr.mxu0 0.0
  %11719 = vmatpush1.msra.mxu0 0.0
  %11720 = vmatprep.subr.mxu0 0.0
  %11721 = vmatpush1.msra.mxu0 0.0
  %11722 = vmatprep.subr.mxu0 0.0
  %11723 = vmatpush1.msra.mxu0 0.0
  %11724 = vmatprep.subr.mxu0 0.0
  %11725 = vmatpush1.msra.mxu0 0.0
  %11726 = vmatprep.subr.mxu0 0.0
  %11727 = vmatpush1.msra.mxu0 0.0
  %11728 = vmatprep.subr.mxu0 0.0
  %11729 = vmatpush1.msra.mxu0 0.0
  %11730 = vmatprep.subr.mxu0 0.0
  %11731 = vmatpush1.msra.mxu0 0.0
  %11732 = vmatprep.subr.mxu0 0.0
  %11733 = vmatpush1.msra.mxu0 0.0
  %11734 = vmatprep.subr.mxu0 0.0
  %11735 = vmatpush1.msra.mxu0 0.0
  %11736 = vmatprep.subr.mxu0 0.0
  %11737 = vmatpush1.msra.mxu0 0.0
  %11738 = vmatprep.subr.mxu0 0.0
  %11739 = vmatpush1.msra.mxu0 0.0
  %11740 = vmatprep.subr.mxu0 0.0
  %11741 = vmatpush1.msra.mxu0 %v11708
  %11742 = vmatprep.subr.mxu0 0.0
  %11743 = vmatpush2.msra.mxu0 0.0
  %11744 = vmatprep.subr.mxu0 0.0
  %11745 = vmatpush2.msra.mxu0 0.0
  %11746 = vmatprep.subr.mxu0 0.0
  %11747 = vmatpush2.msra.mxu0 0.0
  %11748 = vmatprep.subr.mxu0 0.0
  %11749 = vmatpush2.msra.mxu0 0.0
  %11750 = vmatprep.subr.mxu0 0.0
  %11751 = vmatpush2.msra.mxu0 0.0
  %11752 = vmatprep.subr.mxu0 0.0
  %11753 = vmatpush2.msra.mxu0 0.0
  %11754 = vmatprep.subr.mxu0 0.0
  %11755 = vmatpush2.msra.mxu0 0.0
  %11756 = vmatprep.subr.mxu0 0.0
  %11757 = vmatpush2.msra.mxu0 0.0
  %11758 = vmatprep.subr.mxu0 0.0
  %11759 = vmatpush2.msra.mxu0 0.0
  %11760 = vmatprep.subr.mxu0 0.0
  %11761 = vmatpush2.msra.mxu0 0.0
  %11762 = vmatprep.subr.mxu0 0.0
  %11763 = vmatpush2.msra.mxu0 0.0
  %11764 = vmatprep.subr.mxu0 0.0
  %11765 = vmatpush2.msra.mxu0 0.0
  %11766 = vmatprep.subr.mxu0 0.0
  %11767 = vmatpush2.msra.mxu0 0.0
  %11768 = vmatprep.subr.mxu0 0.0
  %11769 = vmatpush2.msra.mxu0 0.0
  %11770 = vmatprep.subr.mxu0 0.0
  %11771 = vmatpush2.msra.mxu0 0.0
  %11772 = vmatprep.subr.mxu0 0.0
  %11773 = vmatpush2.msra.mxu0 0.0
  %11774 = vmatprep.mubr.f32.mxu0 0.0
  %11775 = vmatmul.mubr.f32.gmra.mxu0 %v11516
  %v11776 = vpop.f32.mrf.mxu0
  %v11777 = vadd.f32 0.0, %v11776
  %v11778 = vpop.f32.mrf.mxu0
  %11779 = vmatprep.mubr.f32.mxu0 0.0
  %11780 = vmatmul.mubr.f32.gmra.mxu0 %v11519
  %v11781 = vpop.f32.mrf.mxu0
  %v11782 = vadd.f32 0.0, %v11781
  %v11783 = vpop.f32.mrf.mxu0
  %11784 = vmatprep.mubr.f32.mxu0 0.0
  %11785 = vmatmul.mubr.f32.gmra.mxu0 %v11522
  %v11786 = vpop.f32.mrf.mxu0
  %v11787 = vadd.f32 0.0, %v11786
  %v11788 = vpop.f32.mrf.mxu0
  %11789 = vmatprep.mubr.f32.mxu0 0.0
  %11790 = vmatmul.mubr.f32.gmra.mxu0 %v11525
  %v11791 = vpop.f32.mrf.mxu0
  %v11792 = vadd.f32 0.0, %v11791
  %v11793 = vpop.f32.mrf.mxu0
  %11794 = vmatprep.mubr.f32.mxu0 0.0
  %11795 = vmatmul.mubr.f32.gmra.mxu0 %v11528
  %v11796 = vpop.f32.mrf.mxu0
  %v11797 = vadd.f32 0.0, %v11796
  %v11798 = vpop.f32.mrf.mxu0
  %11799 = vmatprep.mubr.f32.mxu0 0.0
  %11800 = vmatmul.mubr.f32.gmra.mxu0 %v11531
  %v11801 = vpop.f32.mrf.mxu0
  %v11802 = vadd.f32 0.0, %v11801
  %v11803 = vpop.f32.mrf.mxu0
  %11804 = vmatprep.mubr.f32.mxu0 0.0
  %11805 = vmatmul.mubr.f32.gmra.mxu0 %v11534
  %v11806 = vpop.f32.mrf.mxu0
  %v11807 = vadd.f32 0.0, %v11806
  %v11808 = vpop.f32.mrf.mxu0
  %11809 = vmatprep.mubr.f32.mxu0 0.0
  %11810 = vmatmul.mubr.f32.gmra.mxu0 %v11537
  %v11811 = vpop.f32.mrf.mxu0
  %v11812 = vadd.f32 0.0, %v11811
  %v11813 = vpop.f32.mrf.mxu0
  %11814 = vmatprep.mubr.f32.mxu0 0.0
  %11815 = vmatmul.mubr.f32.gmra.mxu0 %v11540
  %v11816 = vpop.f32.mrf.mxu0
  %v11817 = vadd.f32 0.0, %v11816
  %v11818 = vpop.f32.mrf.mxu0
  %11819 = vmatprep.mubr.f32.mxu0 0.0
  %11820 = vmatmul.mubr.f32.gmra.mxu0 %v11543
  %v11821 = vpop.f32.mrf.mxu0
  %v11822 = vadd.f32 0.0, %v11821
  %v11823 = vpop.f32.mrf.mxu0
  %11824 = vmatprep.mubr.f32.mxu0 0.0
  %11825 = vmatmul.mubr.f32.gmra.mxu0 %v11546
  %v11826 = vpop.f32.mrf.mxu0
  %v11827 = vadd.f32 0.0, %v11826
  %v11828 = vpop.f32.mrf.mxu0
  %11829 = vmatprep.mubr.f32.mxu0 0.0
  %11830 = vmatmul.mubr.f32.gmra.mxu0 %v11549
  %v11831 = vpop.f32.mrf.mxu0
  %v11832 = vadd.f32 0.0, %v11831
  %v11833 = vpop.f32.mrf.mxu0
  %11834 = vmatprep.mubr.f32.mxu0 0.0
  %11835 = vmatmul.mubr.f32.gmra.mxu0 %v11552
  %v11836 = vpop.f32.mrf.mxu0
  %v11837 = vadd.f32 0.0, %v11836
  %v11838 = vpop.f32.mrf.mxu0
  %11839 = vmatprep.mubr.f32.mxu0 0.0
  %11840 = vmatmul.mubr.f32.gmra.mxu0 %v11555
  %v11841 = vpop.f32.mrf.mxu0
  %v11842 = vadd.f32 0.0, %v11841
  %v11843 = vpop.f32.mrf.mxu0
  %11844 = vmatprep.mubr.f32.mxu0 0.0
  %11845 = vmatmul.mubr.f32.gmra.mxu0 %v11558
  %v11846 = vpop.f32.mrf.mxu0
  %v11847 = vadd.f32 0.0, %v11846
  %v11848 = vpop.f32.mrf.mxu0
  %11849 = vmatprep.mubr.f32.mxu0 0.0
  %11850 = vmatmul.mubr.f32.gmra.mxu0 %v11561
  %v11851 = vpop.f32.mrf.mxu0
  %v11852 = vadd.f32 0.0, %v11851
  %v11853 = vpop.f32.mrf.mxu0
  %11854 = vmatprep.mubr.f32.mxu0 0.0
  %11855 = vmatmul.mubr.f32.gmra.mxu0 %v11564
  %v11856 = vpop.f32.mrf.mxu0
  %v11857 = vadd.f32 0.0, %v11856
  %v11858 = vpop.f32.mrf.mxu0
  %11859 = vmatprep.mubr.f32.mxu0 0.0
  %11860 = vmatmul.mubr.f32.gmra.mxu0 %v11567
  %v11861 = vpop.f32.mrf.mxu0
  %v11862 = vadd.f32 0.0, %v11861
  %v11863 = vpop.f32.mrf.mxu0
  %11864 = vmatprep.mubr.f32.mxu0 0.0
  %11865 = vmatmul.mubr.f32.gmra.mxu0 %v11570
  %v11866 = vpop.f32.mrf.mxu0
  %v11867 = vadd.f32 0.0, %v11866
  %v11868 = vpop.f32.mrf.mxu0
  %11869 = vmatprep.mubr.f32.mxu0 0.0
  %11870 = vmatmul.mubr.f32.gmra.mxu0 %v11573
  %v11871 = vpop.f32.mrf.mxu0
  %v11872 = vadd.f32 0.0, %v11871
  %v11873 = vpop.f32.mrf.mxu0
  %11874 = vmatprep.mubr.f32.mxu0 0.0
  %11875 = vmatmul.mubr.f32.gmra.mxu0 %v11576
  %v11876 = vpop.f32.mrf.mxu0
  %v11877 = vadd.f32 0.0, %v11876
  %v11878 = vpop.f32.mrf.mxu0
  %11879 = vmatprep.mubr.f32.mxu0 0.0
  %11880 = vmatmul.mubr.f32.gmra.mxu0 %v11579
  %v11881 = vpop.f32.mrf.mxu0
  %v11882 = vadd.f32 0.0, %v11881
  %v11883 = vpop.f32.mrf.mxu0
  %11884 = vmatprep.mubr.f32.mxu0 0.0
  %11885 = vmatmul.mubr.f32.gmra.mxu0 %v11582
  %v11886 = vpop.f32.mrf.mxu0
  %v11887 = vadd.f32 0.0, %v11886
  %v11888 = vpop.f32.mrf.mxu0
  %11889 = vmatprep.mubr.f32.mxu0 0.0
  %11890 = vmatmul.mubr.f32.gmra.mxu0 %v11585
  %v11891 = vpop.f32.mrf.mxu0
  %v11892 = vadd.f32 0.0, %v11891
  %v11893 = vpop.f32.mrf.mxu0
  %11894 = vmatprep.mubr.f32.mxu0 0.0
  %11895 = vmatmul.mubr.f32.gmra.mxu0 %v11588
  %v11896 = vpop.f32.mrf.mxu0
  %v11897 = vadd.f32 0.0, %v11896
  %v11898 = vpop.f32.mrf.mxu0
  %11899 = vmatprep.mubr.f32.mxu0 0.0
  %11900 = vmatmul.mubr.f32.gmra.mxu0 %v11591
  %v11901 = vpop.f32.mrf.mxu0
  %v11902 = vadd.f32 0.0, %v11901
  %v11903 = vpop.f32.mrf.mxu0
  %11904 = vmatprep.mubr.f32.mxu0 0.0
  %11905 = vmatmul.mubr.f32.gmra.mxu0 %v11594
  %v11906 = vpop.f32.mrf.mxu0
  %v11907 = vadd.f32 0.0, %v11906
  %v11908 = vpop.f32.mrf.mxu0
  %11909 = vmatprep.mubr.f32.mxu0 0.0
  %11910 = vmatmul.mubr.f32.gmra.mxu0 %v11597
  %v11911 = vpop.f32.mrf.mxu0
  %v11912 = vadd.f32 0.0, %v11911
  %v11913 = vpop.f32.mrf.mxu0
  %11914 = vmatprep.mubr.f32.mxu0 0.0
  %11915 = vmatmul.mubr.f32.gmra.mxu0 %v11600
  %v11916 = vpop.f32.mrf.mxu0
  %v11917 = vadd.f32 0.0, %v11916
  %v11918 = vpop.f32.mrf.mxu0
  %11919 = vmatprep.mubr.f32.mxu0 0.0
  %11920 = vmatmul.mubr.f32.gmra.mxu0 %v11603
  %v11921 = vpop.f32.mrf.mxu0
  %v11922 = vadd.f32 0.0, %v11921
  %v11923 = vpop.f32.mrf.mxu0
  %11924 = vmatprep.mubr.f32.mxu0 0.0
  %11925 = vmatmul.mubr.f32.gmra.mxu0 %v11606
  %v11926 = vpop.f32.mrf.mxu0
  %v11927 = vadd.f32 0.0, %v11926
  %v11928 = vpop.f32.mrf.mxu0
  %11929 = vmatprep.mubr.f32.mxu0 0.0
  %11930 = vmatmul.mubr.f32.gmra.mxu0 %v11609
  %v11931 = vpop.f32.mrf.mxu0
  %v11932 = vadd.f32 0.0, %v11931
  %v11933 = vpop.f32.mrf.mxu0
  %11934 = vmatprep.mubr.f32.mxu0 0.0
  %11935 = vmatmul.mubr.f32.gmra.mxu0 %v11612
  %v11936 = vpop.f32.mrf.mxu0
  %v11937 = vadd.f32 0.0, %v11936
  %v11938 = vpop.f32.mrf.mxu0
  %11939 = vmatprep.mubr.f32.mxu0 0.0
  %11940 = vmatmul.mubr.f32.gmra.mxu0 %v11615
  %v11941 = vpop.f32.mrf.mxu0
  %v11942 = vadd.f32 0.0, %v11941
  %v11943 = vpop.f32.mrf.mxu0
  %11944 = vmatprep.mubr.f32.mxu0 0.0
  %11945 = vmatmul.mubr.f32.gmra.mxu0 %v11618
  %v11946 = vpop.f32.mrf.mxu0
  %v11947 = vadd.f32 0.0, %v11946
  %v11948 = vpop.f32.mrf.mxu0
  %11949 = vmatprep.mubr.f32.mxu0 0.0
  %11950 = vmatmul.mubr.f32.gmra.mxu0 %v11621
  %v11951 = vpop.f32.mrf.mxu0
  %v11952 = vadd.f32 0.0, %v11951
  %v11953 = vpop.f32.mrf.mxu0
  %11954 = vmatprep.mubr.f32.mxu0 0.0
  %11955 = vmatmul.mubr.f32.gmra.mxu0 %v11624
  %v11956 = vpop.f32.mrf.mxu0
  %v11957 = vadd.f32 0.0, %v11956
  %v11958 = vpop.f32.mrf.mxu0
  %11959 = vmatprep.mubr.f32.mxu0 0.0
  %11960 = vmatmul.mubr.f32.gmra.mxu0 %v11627
  %v11961 = vpop.f32.mrf.mxu0
  %v11962 = vadd.f32 0.0, %v11961
  %v11963 = vpop.f32.mrf.mxu0
  %11964 = vmatprep.mubr.f32.mxu0 0.0
  %11965 = vmatmul.mubr.f32.gmra.mxu0 %v11630
  %v11966 = vpop.f32.mrf.mxu0
  %v11967 = vadd.f32 0.0, %v11966
  %v11968 = vpop.f32.mrf.mxu0
  %11969 = vmatprep.mubr.f32.mxu0 0.0
  %11970 = vmatmul.mubr.f32.gmra.mxu0 %v11633
  %v11971 = vpop.f32.mrf.mxu0
  %v11972 = vadd.f32 0.0, %v11971
  %v11973 = vpop.f32.mrf.mxu0
  %11974 = vmatprep.mubr.f32.mxu0 0.0
  %11975 = vmatmul.mubr.f32.gmra.mxu0 %v11636
  %v11976 = vpop.f32.mrf.mxu0
  %v11977 = vadd.f32 0.0, %v11976
  %v11978 = vpop.f32.mrf.mxu0
  %11979 = vmatprep.mubr.f32.mxu0 0.0
  %11980 = vmatmul.mubr.f32.gmra.mxu0 %v11639
  %v11981 = vpop.f32.mrf.mxu0
  %v11982 = vadd.f32 0.0, %v11981
  %v11983 = vpop.f32.mrf.mxu0
  %11984 = vmatprep.mubr.f32.mxu0 0.0
  %11985 = vmatmul.mubr.f32.gmra.mxu0 %v11642
  %v11986 = vpop.f32.mrf.mxu0
  %v11987 = vadd.f32 0.0, %v11986
  %v11988 = vpop.f32.mrf.mxu0
  %11989 = vmatprep.mubr.f32.mxu0 0.0
  %11990 = vmatmul.mubr.f32.gmra.mxu0 %v11645
  %v11991 = vpop.f32.mrf.mxu0
  %v11992 = vadd.f32 0.0, %v11991
  %v11993 = vpop.f32.mrf.mxu0
  %11994 = vmatprep.mubr.f32.mxu0 0.0
  %11995 = vmatmul.mubr.f32.gmra.mxu0 %v11648
  %v11996 = vpop.f32.mrf.mxu0
  %v11997 = vadd.f32 0.0, %v11996
  %v11998 = vpop.f32.mrf.mxu0
  %11999 = vmatprep.mubr.f32.mxu0 0.0
  %12000 = vmatmul.mubr.f32.gmra.mxu0 %v11651
  %v12001 = vpop.f32.mrf.mxu0
  %v12002 = vadd.f32 0.0, %v12001
  %v12003 = vpop.f32.mrf.mxu0
  %12004 = vmatprep.mubr.f32.mxu0 0.0
  %12005 = vmatmul.mubr.f32.gmra.mxu0 %v11654
  %v12006 = vpop.f32.mrf.mxu0
  %v12007 = vadd.f32 0.0, %v12006
  %v12008 = vpop.f32.mrf.mxu0
  %12009 = vmatprep.mubr.f32.mxu0 0.0
  %12010 = vmatmul.mubr.f32.gmra.mxu0 %v11657
  %v12011 = vpop.f32.mrf.mxu0
  %v12012 = vadd.f32 0.0, %v12011
  %v12013 = vpop.f32.mrf.mxu0
  %12014 = vmatprep.mubr.f32.mxu0 0.0
  %12015 = vmatmul.mubr.f32.gmra.mxu0 %v11660
  %v12016 = vpop.f32.mrf.mxu0
  %v12017 = vadd.f32 0.0, %v12016
  %v12018 = vpop.f32.mrf.mxu0
  %12019 = vmatprep.mubr.f32.mxu0 0.0
  %12020 = vmatmul.mubr.f32.gmra.mxu0 %v11663
  %v12021 = vpop.f32.mrf.mxu0
  %v12022 = vadd.f32 0.0, %v12021
  %v12023 = vpop.f32.mrf.mxu0
  %12024 = vmatprep.mubr.f32.mxu0 0.0
  %12025 = vmatmul.mubr.f32.gmra.mxu0 %v11666
  %v12026 = vpop.f32.mrf.mxu0
  %v12027 = vadd.f32 0.0, %v12026
  %v12028 = vpop.f32.mrf.mxu0
  %12029 = vmatprep.mubr.f32.mxu0 0.0
  %12030 = vmatmul.mubr.f32.gmra.mxu0 %v11669
  %v12031 = vpop.f32.mrf.mxu0
  %v12032 = vadd.f32 0.0, %v12031
  %v12033 = vpop.f32.mrf.mxu0
  %12034 = vmatprep.mubr.f32.mxu0 0.0
  %12035 = vmatmul.mubr.f32.gmra.mxu0 %v11672
  %v12036 = vpop.f32.mrf.mxu0
  %v12037 = vadd.f32 0.0, %v12036
  %v12038 = vpop.f32.mrf.mxu0
  %12039 = vmatprep.mubr.f32.mxu0 0.0
  %12040 = vmatmul.mubr.f32.gmra.mxu0 %v11675
  %v12041 = vpop.f32.mrf.mxu0
  %v12042 = vadd.f32 0.0, %v12041
  %v12043 = vpop.f32.mrf.mxu0
  %12044 = vmatprep.mubr.f32.mxu0 0.0
  %12045 = vmatmul.mubr.f32.gmra.mxu0 %v11678
  %v12046 = vpop.f32.mrf.mxu0
  %v12047 = vadd.f32 0.0, %v12046
  %v12048 = vpop.f32.mrf.mxu0
  %12049 = vmatprep.mubr.f32.mxu0 0.0
  %12050 = vmatmul.mubr.f32.gmra.mxu0 %v11681
  %v12051 = vpop.f32.mrf.mxu0
  %v12052 = vadd.f32 0.0, %v12051
  %v12053 = vpop.f32.mrf.mxu0
  %12054 = vmatprep.mubr.f32.mxu0 0.0
  %12055 = vmatmul.mubr.f32.gmra.mxu0 %v11684
  %v12056 = vpop.f32.mrf.mxu0
  %v12057 = vadd.f32 0.0, %v12056
  %v12058 = vpop.f32.mrf.mxu0
  %12059 = vmatprep.mubr.f32.mxu0 0.0
  %12060 = vmatmul.mubr.f32.gmra.mxu0 %v11687
  %v12061 = vpop.f32.mrf.mxu0
  %v12062 = vadd.f32 0.0, %v12061
  %v12063 = vpop.f32.mrf.mxu0
  %12064 = vmatprep.mubr.f32.mxu0 0.0
  %12065 = vmatmul.mubr.f32.gmra.mxu0 %v11690
  %v12066 = vpop.f32.mrf.mxu0
  %v12067 = vadd.f32 0.0, %v12066
  %v12068 = vpop.f32.mrf.mxu0
  %12069 = vmatprep.mubr.f32.mxu0 0.0
  %12070 = vmatmul.mubr.f32.gmra.mxu0 %v11693
  %v12071 = vpop.f32.mrf.mxu0
  %v12072 = vadd.f32 0.0, %v12071
  %v12073 = vpop.f32.mrf.mxu0
  %12074 = vmatprep.mubr.f32.mxu0 0.0
  %12075 = vmatmul.mubr.f32.gmra.mxu0 %v11696
  %v12076 = vpop.f32.mrf.mxu0
  %v12077 = vadd.f32 0.0, %v12076
  %v12078 = vpop.f32.mrf.mxu0
  %12079 = vmatprep.mubr.f32.mxu0 0.0
  %12080 = vmatmul.mubr.f32.gmra.mxu0 %v11699
  %v12081 = vpop.f32.mrf.mxu0
  %v12082 = vadd.f32 0.0, %v12081
  %v12083 = vpop.f32.mrf.mxu0
  %12084 = vmatprep.mubr.f32.mxu0 0.0
  %12085 = vmatmul.mubr.f32.gmra.mxu0 %v11702
  %v12086 = vpop.f32.mrf.mxu0
  %v12087 = vadd.f32 0.0, %v12086
  %v12088 = vpop.f32.mrf.mxu0
  %12089 = vmatprep.mubr.f32.mxu0 0.0
  %12090 = vmatmul.mubr.f32.gmra.mxu0 %v11705
  %v12091 = vpop.f32.mrf.mxu0
  %v12092 = vadd.f32 0.0, %v12091
  %v12093 = vpop.f32.mrf.mxu0
  %12094 = vdwg.mxu0
  %v12095 = vadd.f32 %v11385, %v11777
  %v12096 = vadd.f32 %v11386, %v11782
  %v12097 = vadd.f32 %v11387, %v11787
  %v12098 = vadd.f32 %v11388, %v11792
  %v12099 = vadd.f32 %v11389, %v11797
  %v12100 = vadd.f32 %v11390, %v11802
  %v12101 = vadd.f32 %v11391, %v11807
  %v12102 = vadd.f32 %v11392, %v11812
  %v12103 = vadd.f32 %v11393, %v11817
  %v12104 = vadd.f32 %v11394, %v11822
  %v12105 = vadd.f32 %v11395, %v11827
  %v12106 = vadd.f32 %v11396, %v11832
  %v12107 = vadd.f32 %v11397, %v11837
  %v12108 = vadd.f32 %v11398, %v11842
  %v12109 = vadd.f32 %v11399, %v11847
  %v12110 = vadd.f32 %v11400, %v11852
  %v12111 = vadd.f32 %v11401, %v11857
  %v12112 = vadd.f32 %v11402, %v11862
  %v12113 = vadd.f32 %v11403, %v11867
  %v12114 = vadd.f32 %v11404, %v11872
  %v12115 = vadd.f32 %v11405, %v11877
  %v12116 = vadd.f32 %v11406, %v11882
  %v12117 = vadd.f32 %v11407, %v11887
  %v12118 = vadd.f32 %v11408, %v11892
  %v12119 = vadd.f32 %v11409, %v11897
  %v12120 = vadd.f32 %v11410, %v11902
  %v12121 = vadd.f32 %v11411, %v11907
  %v12122 = vadd.f32 %v11412, %v11912
  %v12123 = vadd.f32 %v11413, %v11917
  %v12124 = vadd.f32 %v11414, %v11922
  %v12125 = vadd.f32 %v11415, %v11927
  %v12126 = vadd.f32 %v11416, %v11932
  %v12127 = vadd.f32 %v11417, %v11937
  %v12128 = vadd.f32 %v11418, %v11942
  %v12129 = vadd.f32 %v11419, %v11947
  %v12130 = vadd.f32 %v11420, %v11952
  %v12131 = vadd.f32 %v11421, %v11957
  %v12132 = vadd.f32 %v11422, %v11962
  %v12133 = vadd.f32 %v11423, %v11967
  %v12134 = vadd.f32 %v11424, %v11972
  %v12135 = vadd.f32 %v11425, %v11977
  %v12136 = vadd.f32 %v11426, %v11982
  %v12137 = vadd.f32 %v11427, %v11987
  %v12138 = vadd.f32 %v11428, %v11992
  %v12139 = vadd.f32 %v11429, %v11997
  %v12140 = vadd.f32 %v11430, %v12002
  %v12141 = vadd.f32 %v11431, %v12007
  %v12142 = vadd.f32 %v11432, %v12012
  %v12143 = vadd.f32 %v11433, %v12017
  %v12144 = vadd.f32 %v11434, %v12022
  %v12145 = vadd.f32 %v11435, %v12027
  %v12146 = vadd.f32 %v11436, %v12032
  %v12147 = vadd.f32 %v11437, %v12037
  %v12148 = vadd.f32 %v11438, %v12042
  %v12149 = vadd.f32 %v11439, %v12047
  %v12150 = vadd.f32 %v11440, %v12052
  %v12151 = vadd.f32 %v11441, %v12057
  %v12152 = vadd.f32 %v11442, %v12062
  %v12153 = vadd.f32 %v11443, %v12067
  %v12154 = vadd.f32 %v11444, %v12072
  %v12155 = vadd.f32 %v11445, %v12077
  %v12156 = vadd.f32 %v11446, %v12082
  %v12157 = vadd.f32 %v11447, %v12087
  %v12158 = vadd.f32 %v11448, %v12092
  %v12159 = vld [vmem:[%s4430 + $0x1] sm:$0xff]
  %v12160 = vld [vmem:[%s4430 + $0x9] sm:$0xff]
  %v12161 = vld [vmem:[%s4430 + $0x19] sm:$0xff]
  %v12162 = vld [vmem:[%s4430 + $0x21] sm:$0xff]
  %v12163 = vld [vmem:[%s4430 + $0x31] sm:$0xff]
  %v12164 = vld [vmem:[%s4430 + $0x39] sm:$0xff]
  %v12165 = vld [vmem:[%s4430 + $0x49] sm:$0xff]
  %v12166 = vld [vmem:[%s4430 + $0x51] sm:$0xff]
  %v12167 = vld [vmem:[%s4430 + $0x61] sm:$0xff]
  %v12168 = vld [vmem:[%s4430 + $0x69] sm:$0xff]
  %v12169 = vld [vmem:[%s4430 + $0x79] sm:$0xff]
  %v12170 = vld [vmem:[%s4430 + $0x81] sm:$0xff]
  %v12171 = vld [vmem:[%s4430 + $0x91] sm:$0xff]
  %v12172 = vld [vmem:[%s4430 + $0x99] sm:$0xff]
  %v12173 = vld [vmem:[%s4430 + $0xa9] sm:$0xff]
  %v12174 = vld [vmem:[%s4430 + $0xb1] sm:$0xff]
  %v12175 = vld [vmem:[%s4430 + $0xc1] sm:$0xff]
  %v12176 = vld [vmem:[%s4430 + $0xc9] sm:$0xff]
  %v12177 = vld [vmem:[%s4430 + $0xd9] sm:$0xff]
  %v12178 = vld [vmem:[%s4430 + $0xe1] sm:$0xff]
  %v12179 = vld [vmem:[%s4430 + $0xf1] sm:$0xff]
  %v12180 = vld [vmem:[%s4430 + $0xf9] sm:$0xff]
  %v12181 = vld [vmem:[%s4430 + $0x109] sm:$0xff]
  %v12182 = vld [vmem:[%s4430 + $0x111] sm:$0xff]
  %v12183 = vld [vmem:[%s4430 + $0x121] sm:$0xff]
  %v12184 = vld [vmem:[%s4430 + $0x129] sm:$0xff]
  %v12185 = vld [vmem:[%s4430 + $0x139] sm:$0xff]
  %v12186 = vld [vmem:[%s4430 + $0x141] sm:$0xff]
  %v12187 = vld [vmem:[%s4430 + $0x151] sm:$0xff]
  %v12188 = vld [vmem:[%s4430 + $0x159] sm:$0xff]
  %v12189 = vld [vmem:[%s4430 + $0x169] sm:$0xff]
  %v12190 = vld [vmem:[%s4430 + $0x171] sm:$0xff]
  %v12191 = vld [vmem:[%s4430 + $0x1b1] sm:$0xff]
  %v12192 = vld [vmem:[%s4430 + $0x1b9] sm:$0xff]
  %v12193 = vld [vmem:[%s4430 + $0x1c9] sm:$0xff]
  %v12194 = vld [vmem:[%s4430 + $0x1d1] sm:$0xff]
  %v12195 = vld [vmem:[%s4430 + $0x1e1] sm:$0xff]
  %v12196 = vld [vmem:[%s4430 + $0x1e9] sm:$0xff]
  %v12197 = vld [vmem:[%s4430 + $0x1f9] sm:$0xff]
  %v12198 = vld [vmem:[%s4430 + $0x201] sm:$0xff]
  %v12199 = vld [vmem:[%s4430 + $0x211] sm:$0xff]
  %v12200 = vld [vmem:[%s4430 + $0x219] sm:$0xff]
  %v12201 = vld [vmem:[%s4430 + $0x229] sm:$0xff]
  %v12202 = vld [vmem:[%s4430 + $0x231] sm:$0xff]
  %v12203 = vld [vmem:[%s4430 + $0x241] sm:$0xff]
  %v12204 = vld [vmem:[%s4430 + $0x249] sm:$0xff]
  %v12205 = vld [vmem:[%s4430 + $0x259] sm:$0xff]
  %v12206 = vld [vmem:[%s4430 + $0x261] sm:$0xff]
  %v12207 = vld [vmem:[%s4430 + $0x271] sm:$0xff]
  %v12208 = vld [vmem:[%s4430 + $0x279] sm:$0xff]
  %v12209 = vld [vmem:[%s4430 + $0x289] sm:$0xff]
  %v12210 = vld [vmem:[%s4430 + $0x291] sm:$0xff]
  %v12211 = vld [vmem:[%s4430 + $0x2a1] sm:$0xff]
  %v12212 = vld [vmem:[%s4430 + $0x2a9] sm:$0xff]
  %v12213 = vld [vmem:[%s4430 + $0x2b9] sm:$0xff]
  %v12214 = vld [vmem:[%s4430 + $0x2c1] sm:$0xff]
  %v12215 = vld [vmem:[%s4430 + $0x2d1] sm:$0xff]
  %v12216 = vld [vmem:[%s4430 + $0x2d9] sm:$0xff]
  %v12217 = vld [vmem:[%s4430 + $0x2e9] sm:$0xff]
  %v12218 = vld [vmem:[%s4430 + $0x2f1] sm:$0xff]
  %v12219 = vld [vmem:[%s4430 + $0x301] sm:$0xff]
  %v12220 = vld [vmem:[%s4430 + $0x309] sm:$0xff]
  %v12221 = vld [vmem:[%s4430 + $0x319] sm:$0xff]
  %v12222 = vld [vmem:[%s4430 + $0x321] sm:$0xff]
  %s12223 = scalar_lea.vmem %s2, 28
  %v12224 = vld [vmem:[%s12223] sm:$0xf]
  %v12226 = vsel %vm79, %v12159, 0
  %v12229 = vsel %vm79, %v12160, 0
  %v12232 = vsel %vm79, %v12161, 0
  %v12235 = vsel %vm79, %v12162, 0
  %v12238 = vsel %vm79, %v12163, 0
  %v12241 = vsel %vm79, %v12164, 0
  %v12244 = vsel %vm79, %v12165, 0
  %v12247 = vsel %vm79, %v12166, 0
  %v12250 = vsel %vm79, %v12167, 0
  %v12253 = vsel %vm79, %v12168, 0
  %v12256 = vsel %vm79, %v12169, 0
  %v12259 = vsel %vm79, %v12170, 0
  %v12262 = vsel %vm79, %v12171, 0
  %v12265 = vsel %vm79, %v12172, 0
  %v12268 = vsel %vm79, %v12173, 0
  %v12271 = vsel %vm79, %v12174, 0
  %v12274 = vsel %vm79, %v12175, 0
  %v12277 = vsel %vm79, %v12176, 0
  %v12280 = vsel %vm79, %v12177, 0
  %v12283 = vsel %vm79, %v12178, 0
  %v12286 = vsel %vm79, %v12179, 0
  %v12289 = vsel %vm79, %v12180, 0
  %v12292 = vsel %vm79, %v12181, 0
  %v12295 = vsel %vm79, %v12182, 0
  %v12298 = vsel %vm79, %v12183, 0
  %v12301 = vsel %vm79, %v12184, 0
  %v12304 = vsel %vm79, %v12185, 0
  %v12307 = vsel %vm79, %v12186, 0
  %v12310 = vsel %vm79, %v12187, 0
  %v12313 = vsel %vm79, %v12188, 0
  %v12316 = vsel %vm79, %v12189, 0
  %v12319 = vsel %vm79, %v12190, 0
  %v12322 = vsel %vm79, %v12191, 0
  %v12325 = vsel %vm79, %v12192, 0
  %v12328 = vsel %vm79, %v12193, 0
  %v12331 = vsel %vm79, %v12194, 0
  %v12334 = vsel %vm79, %v12195, 0
  %v12337 = vsel %vm79, %v12196, 0
  %v12340 = vsel %vm79, %v12197, 0
  %v12343 = vsel %vm79, %v12198, 0
  %v12346 = vsel %vm79, %v12199, 0
  %v12349 = vsel %vm79, %v12200, 0
  %v12352 = vsel %vm79, %v12201, 0
  %v12355 = vsel %vm79, %v12202, 0
  %v12358 = vsel %vm79, %v12203, 0
  %v12361 = vsel %vm79, %v12204, 0
  %v12364 = vsel %vm79, %v12205, 0
  %v12367 = vsel %vm79, %v12206, 0
  %v12370 = vsel %vm79, %v12207, 0
  %v12373 = vsel %vm79, %v12208, 0
  %v12376 = vsel %vm79, %v12209, 0
  %v12379 = vsel %vm79, %v12210, 0
  %v12382 = vsel %vm79, %v12211, 0
  %v12385 = vsel %vm79, %v12212, 0
  %v12388 = vsel %vm79, %v12213, 0
  %v12391 = vsel %vm79, %v12214, 0
  %v12394 = vsel %vm79, %v12215, 0
  %v12397 = vsel %vm79, %v12216, 0
  %v12400 = vsel %vm79, %v12217, 0
  %v12403 = vsel %vm79, %v12218, 0
  %v12406 = vsel %vm79, %v12219, 0
  %v12409 = vsel %vm79, %v12220, 0
  %v12412 = vsel %vm79, %v12221, 0
  %v12415 = vsel %vm79, %v12222, 0
  %v12418 = vsel %vm621, %v12224, 0
  %12420 = vmatprep.subr.mxu0 0.0
  %12421 = vmatpush1.msra.mxu0 0.0
  %12422 = vmatprep.subr.mxu0 0.0
  %12423 = vmatpush1.msra.mxu0 0.0
  %12424 = vmatprep.subr.mxu0 0.0
  %12425 = vmatpush1.msra.mxu0 0.0
  %12426 = vmatprep.subr.mxu0 0.0
  %12427 = vmatpush1.msra.mxu0 0.0
  %12428 = vmatprep.subr.mxu0 0.0
  %12429 = vmatpush1.msra.mxu0 0.0
  %12430 = vmatprep.subr.mxu0 0.0
  %12431 = vmatpush1.msra.mxu0 0.0
  %12432 = vmatprep.subr.mxu0 0.0
  %12433 = vmatpush1.msra.mxu0 0.0
  %12434 = vmatprep.subr.mxu0 0.0
  %12435 = vmatpush1.msra.mxu0 0.0
  %12436 = vmatprep.subr.mxu0 0.0
  %12437 = vmatpush1.msra.mxu0 0.0
  %12438 = vmatprep.subr.mxu0 0.0
  %12439 = vmatpush1.msra.mxu0 0.0
  %12440 = vmatprep.subr.mxu0 0.0
  %12441 = vmatpush1.msra.mxu0 0.0
  %12442 = vmatprep.subr.mxu0 0.0
  %12443 = vmatpush1.msra.mxu0 0.0
  %12444 = vmatprep.subr.mxu0 0.0
  %12445 = vmatpush1.msra.mxu0 0.0
  %12446 = vmatprep.subr.mxu0 0.0
  %12447 = vmatpush1.msra.mxu0 0.0
  %12448 = vmatprep.subr.mxu0 0.0
  %12449 = vmatpush1.msra.mxu0 0.0
  %12450 = vmatprep.subr.mxu0 0.0
  %12451 = vmatpush1.msra.mxu0 %v12418
  %12452 = vmatprep.subr.mxu0 0.0
  %12453 = vmatpush2.msra.mxu0 0.0
  %12454 = vmatprep.subr.mxu0 0.0
  %12455 = vmatpush2.msra.mxu0 0.0
  %12456 = vmatprep.subr.mxu0 0.0
  %12457 = vmatpush2.msra.mxu0 0.0
  %12458 = vmatprep.subr.mxu0 0.0
  %12459 = vmatpush2.msra.mxu0 0.0
  %12460 = vmatprep.subr.mxu0 0.0
  %12461 = vmatpush2.msra.mxu0 0.0
  %12462 = vmatprep.subr.mxu0 0.0
  %12463 = vmatpush2.msra.mxu0 0.0
  %12464 = vmatprep.subr.mxu0 0.0
  %12465 = vmatpush2.msra.mxu0 0.0
  %12466 = vmatprep.subr.mxu0 0.0
  %12467 = vmatpush2.msra.mxu0 0.0
  %12468 = vmatprep.subr.mxu0 0.0
  %12469 = vmatpush2.msra.mxu0 0.0
  %12470 = vmatprep.subr.mxu0 0.0
  %12471 = vmatpush2.msra.mxu0 0.0
  %12472 = vmatprep.subr.mxu0 0.0
  %12473 = vmatpush2.msra.mxu0 0.0
  %12474 = vmatprep.subr.mxu0 0.0
  %12475 = vmatpush2.msra.mxu0 0.0
  %12476 = vmatprep.subr.mxu0 0.0
  %12477 = vmatpush2.msra.mxu0 0.0
  %12478 = vmatprep.subr.mxu0 0.0
  %12479 = vmatpush2.msra.mxu0 0.0
  %12480 = vmatprep.subr.mxu0 0.0
  %12481 = vmatpush2.msra.mxu0 0.0
  %12482 = vmatprep.subr.mxu0 0.0
  %12483 = vmatpush2.msra.mxu0 0.0
  %12484 = vmatprep.mubr.f32.mxu0 0.0
  %12485 = vmatmul.mubr.f32.gmra.mxu0 %v12226
  %v12486 = vpop.f32.mrf.mxu0
  %v12487 = vadd.f32 0.0, %v12486
  %v12488 = vpop.f32.mrf.mxu0
  %12489 = vmatprep.mubr.f32.mxu0 0.0
  %12490 = vmatmul.mubr.f32.gmra.mxu0 %v12229
  %v12491 = vpop.f32.mrf.mxu0
  %v12492 = vadd.f32 0.0, %v12491
  %v12493 = vpop.f32.mrf.mxu0
  %12494 = vmatprep.mubr.f32.mxu0 0.0
  %12495 = vmatmul.mubr.f32.gmra.mxu0 %v12232
  %v12496 = vpop.f32.mrf.mxu0
  %v12497 = vadd.f32 0.0, %v12496
  %v12498 = vpop.f32.mrf.mxu0
  %12499 = vmatprep.mubr.f32.mxu0 0.0
  %12500 = vmatmul.mubr.f32.gmra.mxu0 %v12235
  %v12501 = vpop.f32.mrf.mxu0
  %v12502 = vadd.f32 0.0, %v12501
  %v12503 = vpop.f32.mrf.mxu0
  %12504 = vmatprep.mubr.f32.mxu0 0.0
  %12505 = vmatmul.mubr.f32.gmra.mxu0 %v12238
  %v12506 = vpop.f32.mrf.mxu0
  %v12507 = vadd.f32 0.0, %v12506
  %v12508 = vpop.f32.mrf.mxu0
  %12509 = vmatprep.mubr.f32.mxu0 0.0
  %12510 = vmatmul.mubr.f32.gmra.mxu0 %v12241
  %v12511 = vpop.f32.mrf.mxu0
  %v12512 = vadd.f32 0.0, %v12511
  %v12513 = vpop.f32.mrf.mxu0
  %12514 = vmatprep.mubr.f32.mxu0 0.0
  %12515 = vmatmul.mubr.f32.gmra.mxu0 %v12244
  %v12516 = vpop.f32.mrf.mxu0
  %v12517 = vadd.f32 0.0, %v12516
  %v12518 = vpop.f32.mrf.mxu0
  %12519 = vmatprep.mubr.f32.mxu0 0.0
  %12520 = vmatmul.mubr.f32.gmra.mxu0 %v12247
  %v12521 = vpop.f32.mrf.mxu0
  %v12522 = vadd.f32 0.0, %v12521
  %v12523 = vpop.f32.mrf.mxu0
  %12524 = vmatprep.mubr.f32.mxu0 0.0
  %12525 = vmatmul.mubr.f32.gmra.mxu0 %v12250
  %v12526 = vpop.f32.mrf.mxu0
  %v12527 = vadd.f32 0.0, %v12526
  %v12528 = vpop.f32.mrf.mxu0
  %12529 = vmatprep.mubr.f32.mxu0 0.0
  %12530 = vmatmul.mubr.f32.gmra.mxu0 %v12253
  %v12531 = vpop.f32.mrf.mxu0
  %v12532 = vadd.f32 0.0, %v12531
  %v12533 = vpop.f32.mrf.mxu0
  %12534 = vmatprep.mubr.f32.mxu0 0.0
  %12535 = vmatmul.mubr.f32.gmra.mxu0 %v12256
  %v12536 = vpop.f32.mrf.mxu0
  %v12537 = vadd.f32 0.0, %v12536
  %v12538 = vpop.f32.mrf.mxu0
  %12539 = vmatprep.mubr.f32.mxu0 0.0
  %12540 = vmatmul.mubr.f32.gmra.mxu0 %v12259
  %v12541 = vpop.f32.mrf.mxu0
  %v12542 = vadd.f32 0.0, %v12541
  %v12543 = vpop.f32.mrf.mxu0
  %12544 = vmatprep.mubr.f32.mxu0 0.0
  %12545 = vmatmul.mubr.f32.gmra.mxu0 %v12262
  %v12546 = vpop.f32.mrf.mxu0
  %v12547 = vadd.f32 0.0, %v12546
  %v12548 = vpop.f32.mrf.mxu0
  %12549 = vmatprep.mubr.f32.mxu0 0.0
  %12550 = vmatmul.mubr.f32.gmra.mxu0 %v12265
  %v12551 = vpop.f32.mrf.mxu0
  %v12552 = vadd.f32 0.0, %v12551
  %v12553 = vpop.f32.mrf.mxu0
  %12554 = vmatprep.mubr.f32.mxu0 0.0
  %12555 = vmatmul.mubr.f32.gmra.mxu0 %v12268
  %v12556 = vpop.f32.mrf.mxu0
  %v12557 = vadd.f32 0.0, %v12556
  %v12558 = vpop.f32.mrf.mxu0
  %12559 = vmatprep.mubr.f32.mxu0 0.0
  %12560 = vmatmul.mubr.f32.gmra.mxu0 %v12271
  %v12561 = vpop.f32.mrf.mxu0
  %v12562 = vadd.f32 0.0, %v12561
  %v12563 = vpop.f32.mrf.mxu0
  %12564 = vmatprep.mubr.f32.mxu0 0.0
  %12565 = vmatmul.mubr.f32.gmra.mxu0 %v12274
  %v12566 = vpop.f32.mrf.mxu0
  %v12567 = vadd.f32 0.0, %v12566
  %v12568 = vpop.f32.mrf.mxu0
  %12569 = vmatprep.mubr.f32.mxu0 0.0
  %12570 = vmatmul.mubr.f32.gmra.mxu0 %v12277
  %v12571 = vpop.f32.mrf.mxu0
  %v12572 = vadd.f32 0.0, %v12571
  %v12573 = vpop.f32.mrf.mxu0
  %12574 = vmatprep.mubr.f32.mxu0 0.0
  %12575 = vmatmul.mubr.f32.gmra.mxu0 %v12280
  %v12576 = vpop.f32.mrf.mxu0
  %v12577 = vadd.f32 0.0, %v12576
  %v12578 = vpop.f32.mrf.mxu0
  %12579 = vmatprep.mubr.f32.mxu0 0.0
  %12580 = vmatmul.mubr.f32.gmra.mxu0 %v12283
  %v12581 = vpop.f32.mrf.mxu0
  %v12582 = vadd.f32 0.0, %v12581
  %v12583 = vpop.f32.mrf.mxu0
  %12584 = vmatprep.mubr.f32.mxu0 0.0
  %12585 = vmatmul.mubr.f32.gmra.mxu0 %v12286
  %v12586 = vpop.f32.mrf.mxu0
  %v12587 = vadd.f32 0.0, %v12586
  %v12588 = vpop.f32.mrf.mxu0
  %12589 = vmatprep.mubr.f32.mxu0 0.0
  %12590 = vmatmul.mubr.f32.gmra.mxu0 %v12289
  %v12591 = vpop.f32.mrf.mxu0
  %v12592 = vadd.f32 0.0, %v12591
  %v12593 = vpop.f32.mrf.mxu0
  %12594 = vmatprep.mubr.f32.mxu0 0.0
  %12595 = vmatmul.mubr.f32.gmra.mxu0 %v12292
  %v12596 = vpop.f32.mrf.mxu0
  %v12597 = vadd.f32 0.0, %v12596
  %v12598 = vpop.f32.mrf.mxu0
  %12599 = vmatprep.mubr.f32.mxu0 0.0
  %12600 = vmatmul.mubr.f32.gmra.mxu0 %v12295
  %v12601 = vpop.f32.mrf.mxu0
  %v12602 = vadd.f32 0.0, %v12601
  %v12603 = vpop.f32.mrf.mxu0
  %12604 = vmatprep.mubr.f32.mxu0 0.0
  %12605 = vmatmul.mubr.f32.gmra.mxu0 %v12298
  %v12606 = vpop.f32.mrf.mxu0
  %v12607 = vadd.f32 0.0, %v12606
  %v12608 = vpop.f32.mrf.mxu0
  %12609 = vmatprep.mubr.f32.mxu0 0.0
  %12610 = vmatmul.mubr.f32.gmra.mxu0 %v12301
  %v12611 = vpop.f32.mrf.mxu0
  %v12612 = vadd.f32 0.0, %v12611
  %v12613 = vpop.f32.mrf.mxu0
  %12614 = vmatprep.mubr.f32.mxu0 0.0
  %12615 = vmatmul.mubr.f32.gmra.mxu0 %v12304
  %v12616 = vpop.f32.mrf.mxu0
  %v12617 = vadd.f32 0.0, %v12616
  %v12618 = vpop.f32.mrf.mxu0
  %12619 = vmatprep.mubr.f32.mxu0 0.0
  %12620 = vmatmul.mubr.f32.gmra.mxu0 %v12307
  %v12621 = vpop.f32.mrf.mxu0
  %v12622 = vadd.f32 0.0, %v12621
  %v12623 = vpop.f32.mrf.mxu0
  %12624 = vmatprep.mubr.f32.mxu0 0.0
  %12625 = vmatmul.mubr.f32.gmra.mxu0 %v12310
  %v12626 = vpop.f32.mrf.mxu0
  %v12627 = vadd.f32 0.0, %v12626
  %v12628 = vpop.f32.mrf.mxu0
  %12629 = vmatprep.mubr.f32.mxu0 0.0
  %12630 = vmatmul.mubr.f32.gmra.mxu0 %v12313
  %v12631 = vpop.f32.mrf.mxu0
  %v12632 = vadd.f32 0.0, %v12631
  %v12633 = vpop.f32.mrf.mxu0
  %12634 = vmatprep.mubr.f32.mxu0 0.0
  %12635 = vmatmul.mubr.f32.gmra.mxu0 %v12316
  %v12636 = vpop.f32.mrf.mxu0
  %v12637 = vadd.f32 0.0, %v12636
  %v12638 = vpop.f32.mrf.mxu0
  %12639 = vmatprep.mubr.f32.mxu0 0.0
  %12640 = vmatmul.mubr.f32.gmra.mxu0 %v12319
  %v12641 = vpop.f32.mrf.mxu0
  %v12642 = vadd.f32 0.0, %v12641
  %v12643 = vpop.f32.mrf.mxu0
  %12644 = vmatprep.mubr.f32.mxu0 0.0
  %12645 = vmatmul.mubr.f32.gmra.mxu0 %v12322
  %v12646 = vpop.f32.mrf.mxu0
  %v12647 = vadd.f32 0.0, %v12646
  %v12648 = vpop.f32.mrf.mxu0
  %12649 = vmatprep.mubr.f32.mxu0 0.0
  %12650 = vmatmul.mubr.f32.gmra.mxu0 %v12325
  %v12651 = vpop.f32.mrf.mxu0
  %v12652 = vadd.f32 0.0, %v12651
  %v12653 = vpop.f32.mrf.mxu0
  %12654 = vmatprep.mubr.f32.mxu0 0.0
  %12655 = vmatmul.mubr.f32.gmra.mxu0 %v12328
  %v12656 = vpop.f32.mrf.mxu0
  %v12657 = vadd.f32 0.0, %v12656
  %v12658 = vpop.f32.mrf.mxu0
  %12659 = vmatprep.mubr.f32.mxu0 0.0
  %12660 = vmatmul.mubr.f32.gmra.mxu0 %v12331
  %v12661 = vpop.f32.mrf.mxu0
  %v12662 = vadd.f32 0.0, %v12661
  %v12663 = vpop.f32.mrf.mxu0
  %12664 = vmatprep.mubr.f32.mxu0 0.0
  %12665 = vmatmul.mubr.f32.gmra.mxu0 %v12334
  %v12666 = vpop.f32.mrf.mxu0
  %v12667 = vadd.f32 0.0, %v12666
  %v12668 = vpop.f32.mrf.mxu0
  %12669 = vmatprep.mubr.f32.mxu0 0.0
  %12670 = vmatmul.mubr.f32.gmra.mxu0 %v12337
  %v12671 = vpop.f32.mrf.mxu0
  %v12672 = vadd.f32 0.0, %v12671
  %v12673 = vpop.f32.mrf.mxu0
  %12674 = vmatprep.mubr.f32.mxu0 0.0
  %12675 = vmatmul.mubr.f32.gmra.mxu0 %v12340
  %v12676 = vpop.f32.mrf.mxu0
  %v12677 = vadd.f32 0.0, %v12676
  %v12678 = vpop.f32.mrf.mxu0
  %12679 = vmatprep.mubr.f32.mxu0 0.0
  %12680 = vmatmul.mubr.f32.gmra.mxu0 %v12343
  %v12681 = vpop.f32.mrf.mxu0
  %v12682 = vadd.f32 0.0, %v12681
  %v12683 = vpop.f32.mrf.mxu0
  %12684 = vmatprep.mubr.f32.mxu0 0.0
  %12685 = vmatmul.mubr.f32.gmra.mxu0 %v12346
  %v12686 = vpop.f32.mrf.mxu0
  %v12687 = vadd.f32 0.0, %v12686
  %v12688 = vpop.f32.mrf.mxu0
  %12689 = vmatprep.mubr.f32.mxu0 0.0
  %12690 = vmatmul.mubr.f32.gmra.mxu0 %v12349
  %v12691 = vpop.f32.mrf.mxu0
  %v12692 = vadd.f32 0.0, %v12691
  %v12693 = vpop.f32.mrf.mxu0
  %12694 = vmatprep.mubr.f32.mxu0 0.0
  %12695 = vmatmul.mubr.f32.gmra.mxu0 %v12352
  %v12696 = vpop.f32.mrf.mxu0
  %v12697 = vadd.f32 0.0, %v12696
  %v12698 = vpop.f32.mrf.mxu0
  %12699 = vmatprep.mubr.f32.mxu0 0.0
  %12700 = vmatmul.mubr.f32.gmra.mxu0 %v12355
  %v12701 = vpop.f32.mrf.mxu0
  %v12702 = vadd.f32 0.0, %v12701
  %v12703 = vpop.f32.mrf.mxu0
  %12704 = vmatprep.mubr.f32.mxu0 0.0
  %12705 = vmatmul.mubr.f32.gmra.mxu0 %v12358
  %v12706 = vpop.f32.mrf.mxu0
  %v12707 = vadd.f32 0.0, %v12706
  %v12708 = vpop.f32.mrf.mxu0
  %12709 = vmatprep.mubr.f32.mxu0 0.0
  %12710 = vmatmul.mubr.f32.gmra.mxu0 %v12361
  %v12711 = vpop.f32.mrf.mxu0
  %v12712 = vadd.f32 0.0, %v12711
  %v12713 = vpop.f32.mrf.mxu0
  %12714 = vmatprep.mubr.f32.mxu0 0.0
  %12715 = vmatmul.mubr.f32.gmra.mxu0 %v12364
  %v12716 = vpop.f32.mrf.mxu0
  %v12717 = vadd.f32 0.0, %v12716
  %v12718 = vpop.f32.mrf.mxu0
  %12719 = vmatprep.mubr.f32.mxu0 0.0
  %12720 = vmatmul.mubr.f32.gmra.mxu0 %v12367
  %v12721 = vpop.f32.mrf.mxu0
  %v12722 = vadd.f32 0.0, %v12721
  %v12723 = vpop.f32.mrf.mxu0
  %12724 = vmatprep.mubr.f32.mxu0 0.0
  %12725 = vmatmul.mubr.f32.gmra.mxu0 %v12370
  %v12726 = vpop.f32.mrf.mxu0
  %v12727 = vadd.f32 0.0, %v12726
  %v12728 = vpop.f32.mrf.mxu0
  %12729 = vmatprep.mubr.f32.mxu0 0.0
  %12730 = vmatmul.mubr.f32.gmra.mxu0 %v12373
  %v12731 = vpop.f32.mrf.mxu0
  %v12732 = vadd.f32 0.0, %v12731
  %v12733 = vpop.f32.mrf.mxu0
  %12734 = vmatprep.mubr.f32.mxu0 0.0
  %12735 = vmatmul.mubr.f32.gmra.mxu0 %v12376
  %v12736 = vpop.f32.mrf.mxu0
  %v12737 = vadd.f32 0.0, %v12736
  %v12738 = vpop.f32.mrf.mxu0
  %12739 = vmatprep.mubr.f32.mxu0 0.0
  %12740 = vmatmul.mubr.f32.gmra.mxu0 %v12379
  %v12741 = vpop.f32.mrf.mxu0
  %v12742 = vadd.f32 0.0, %v12741
  %v12743 = vpop.f32.mrf.mxu0
  %12744 = vmatprep.mubr.f32.mxu0 0.0
  %12745 = vmatmul.mubr.f32.gmra.mxu0 %v12382
  %v12746 = vpop.f32.mrf.mxu0
  %v12747 = vadd.f32 0.0, %v12746
  %v12748 = vpop.f32.mrf.mxu0
  %12749 = vmatprep.mubr.f32.mxu0 0.0
  %12750 = vmatmul.mubr.f32.gmra.mxu0 %v12385
  %v12751 = vpop.f32.mrf.mxu0
  %v12752 = vadd.f32 0.0, %v12751
  %v12753 = vpop.f32.mrf.mxu0
  %12754 = vmatprep.mubr.f32.mxu0 0.0
  %12755 = vmatmul.mubr.f32.gmra.mxu0 %v12388
  %v12756 = vpop.f32.mrf.mxu0
  %v12757 = vadd.f32 0.0, %v12756
  %v12758 = vpop.f32.mrf.mxu0
  %12759 = vmatprep.mubr.f32.mxu0 0.0
  %12760 = vmatmul.mubr.f32.gmra.mxu0 %v12391
  %v12761 = vpop.f32.mrf.mxu0
  %v12762 = vadd.f32 0.0, %v12761
  %v12763 = vpop.f32.mrf.mxu0
  %12764 = vmatprep.mubr.f32.mxu0 0.0
  %12765 = vmatmul.mubr.f32.gmra.mxu0 %v12394
  %v12766 = vpop.f32.mrf.mxu0
  %v12767 = vadd.f32 0.0, %v12766
  %v12768 = vpop.f32.mrf.mxu0
  %12769 = vmatprep.mubr.f32.mxu0 0.0
  %12770 = vmatmul.mubr.f32.gmra.mxu0 %v12397
  %v12771 = vpop.f32.mrf.mxu0
  %v12772 = vadd.f32 0.0, %v12771
  %v12773 = vpop.f32.mrf.mxu0
  %12774 = vmatprep.mubr.f32.mxu0 0.0
  %12775 = vmatmul.mubr.f32.gmra.mxu0 %v12400
  %v12776 = vpop.f32.mrf.mxu0
  %v12777 = vadd.f32 0.0, %v12776
  %v12778 = vpop.f32.mrf.mxu0
  %12779 = vmatprep.mubr.f32.mxu0 0.0
  %12780 = vmatmul.mubr.f32.gmra.mxu0 %v12403
  %v12781 = vpop.f32.mrf.mxu0
  %v12782 = vadd.f32 0.0, %v12781
  %v12783 = vpop.f32.mrf.mxu0
  %12784 = vmatprep.mubr.f32.mxu0 0.0
  %12785 = vmatmul.mubr.f32.gmra.mxu0 %v12406
  %v12786 = vpop.f32.mrf.mxu0
  %v12787 = vadd.f32 0.0, %v12786
  %v12788 = vpop.f32.mrf.mxu0
  %12789 = vmatprep.mubr.f32.mxu0 0.0
  %12790 = vmatmul.mubr.f32.gmra.mxu0 %v12409
  %v12791 = vpop.f32.mrf.mxu0
  %v12792 = vadd.f32 0.0, %v12791
  %v12793 = vpop.f32.mrf.mxu0
  %12794 = vmatprep.mubr.f32.mxu0 0.0
  %12795 = vmatmul.mubr.f32.gmra.mxu0 %v12412
  %v12796 = vpop.f32.mrf.mxu0
  %v12797 = vadd.f32 0.0, %v12796
  %v12798 = vpop.f32.mrf.mxu0
  %12799 = vmatprep.mubr.f32.mxu0 0.0
  %12800 = vmatmul.mubr.f32.gmra.mxu0 %v12415
  %v12801 = vpop.f32.mrf.mxu0
  %v12802 = vadd.f32 0.0, %v12801
  %v12803 = vpop.f32.mrf.mxu0
  %12804 = vdwg.mxu0
  %v12805 = vadd.f32 %v12095, %v12487
  %v12806 = vadd.f32 %v12096, %v12492
  %v12807 = vadd.f32 %v12097, %v12497
  %v12808 = vadd.f32 %v12098, %v12502
  %v12809 = vadd.f32 %v12099, %v12507
  %v12810 = vadd.f32 %v12100, %v12512
  %v12811 = vadd.f32 %v12101, %v12517
  %v12812 = vadd.f32 %v12102, %v12522
  %v12813 = vadd.f32 %v12103, %v12527
  %v12814 = vadd.f32 %v12104, %v12532
  %v12815 = vadd.f32 %v12105, %v12537
  %v12816 = vadd.f32 %v12106, %v12542
  %v12817 = vadd.f32 %v12107, %v12547
  %v12818 = vadd.f32 %v12108, %v12552
  %v12819 = vadd.f32 %v12109, %v12557
  %v12820 = vadd.f32 %v12110, %v12562
  %v12821 = vadd.f32 %v12111, %v12567
  %v12822 = vadd.f32 %v12112, %v12572
  %v12823 = vadd.f32 %v12113, %v12577
  %v12824 = vadd.f32 %v12114, %v12582
  %v12825 = vadd.f32 %v12115, %v12587
  %v12826 = vadd.f32 %v12116, %v12592
  %v12827 = vadd.f32 %v12117, %v12597
  %v12828 = vadd.f32 %v12118, %v12602
  %v12829 = vadd.f32 %v12119, %v12607
  %v12830 = vadd.f32 %v12120, %v12612
  %v12831 = vadd.f32 %v12121, %v12617
  %v12832 = vadd.f32 %v12122, %v12622
  %v12833 = vadd.f32 %v12123, %v12627
  %v12834 = vadd.f32 %v12124, %v12632
  %v12835 = vadd.f32 %v12125, %v12637
  %v12836 = vadd.f32 %v12126, %v12642
  %v12837 = vadd.f32 %v12127, %v12647
  %v12838 = vadd.f32 %v12128, %v12652
  %v12839 = vadd.f32 %v12129, %v12657
  %v12840 = vadd.f32 %v12130, %v12662
  %v12841 = vadd.f32 %v12131, %v12667
  %v12842 = vadd.f32 %v12132, %v12672
  %v12843 = vadd.f32 %v12133, %v12677
  %v12844 = vadd.f32 %v12134, %v12682
  %v12845 = vadd.f32 %v12135, %v12687
  %v12846 = vadd.f32 %v12136, %v12692
  %v12847 = vadd.f32 %v12137, %v12697
  %v12848 = vadd.f32 %v12138, %v12702
  %v12849 = vadd.f32 %v12139, %v12707
  %v12850 = vadd.f32 %v12140, %v12712
  %v12851 = vadd.f32 %v12141, %v12717
  %v12852 = vadd.f32 %v12142, %v12722
  %v12853 = vadd.f32 %v12143, %v12727
  %v12854 = vadd.f32 %v12144, %v12732
  %v12855 = vadd.f32 %v12145, %v12737
  %v12856 = vadd.f32 %v12146, %v12742
  %v12857 = vadd.f32 %v12147, %v12747
  %v12858 = vadd.f32 %v12148, %v12752
  %v12859 = vadd.f32 %v12149, %v12757
  %v12860 = vadd.f32 %v12150, %v12762
  %v12861 = vadd.f32 %v12151, %v12767
  %v12862 = vadd.f32 %v12152, %v12772
  %v12863 = vadd.f32 %v12153, %v12777
  %v12864 = vadd.f32 %v12154, %v12782
  %v12865 = vadd.f32 %v12155, %v12787
  %v12866 = vadd.f32 %v12156, %v12792
  %v12867 = vadd.f32 %v12157, %v12797
  %v12868 = vadd.f32 %v12158, %v12802
  %v12869 = vld [vmem:[%s4430 + $0x2] sm:$0xff]
  %v12870 = vld [vmem:[%s4430 + $0xa] sm:$0xff]
  %v12871 = vld [vmem:[%s4430 + $0x1a] sm:$0xff]
  %v12872 = vld [vmem:[%s4430 + $0x22] sm:$0xff]
  %v12873 = vld [vmem:[%s4430 + $0x32] sm:$0xff]
  %v12874 = vld [vmem:[%s4430 + $0x3a] sm:$0xff]
  %v12875 = vld [vmem:[%s4430 + $0x4a] sm:$0xff]
  %v12876 = vld [vmem:[%s4430 + $0x52] sm:$0xff]
  %v12877 = vld [vmem:[%s4430 + $0x62] sm:$0xff]
  %v12878 = vld [vmem:[%s4430 + $0x6a] sm:$0xff]
  %v12879 = vld [vmem:[%s4430 + $0x7a] sm:$0xff]
  %v12880 = vld [vmem:[%s4430 + $0x82] sm:$0xff]
  %v12881 = vld [vmem:[%s4430 + $0x92] sm:$0xff]
  %v12882 = vld [vmem:[%s4430 + $0x9a] sm:$0xff]
  %v12883 = vld [vmem:[%s4430 + $0xaa] sm:$0xff]
  %v12884 = vld [vmem:[%s4430 + $0xb2] sm:$0xff]
  %v12885 = vld [vmem:[%s4430 + $0xc2] sm:$0xff]
  %v12886 = vld [vmem:[%s4430 + $0xca] sm:$0xff]
  %v12887 = vld [vmem:[%s4430 + $0xda] sm:$0xff]
  %v12888 = vld [vmem:[%s4430 + $0xe2] sm:$0xff]
  %v12889 = vld [vmem:[%s4430 + $0xf2] sm:$0xff]
  %v12890 = vld [vmem:[%s4430 + $0xfa] sm:$0xff]
  %v12891 = vld [vmem:[%s4430 + $0x10a] sm:$0xff]
  %v12892 = vld [vmem:[%s4430 + $0x112] sm:$0xff]
  %v12893 = vld [vmem:[%s4430 + $0x122] sm:$0xff]
  %v12894 = vld [vmem:[%s4430 + $0x12a] sm:$0xff]
  %v12895 = vld [vmem:[%s4430 + $0x13a] sm:$0xff]
  %v12896 = vld [vmem:[%s4430 + $0x142] sm:$0xff]
  %v12897 = vld [vmem:[%s4430 + $0x152] sm:$0xff]
  %v12898 = vld [vmem:[%s4430 + $0x15a] sm:$0xff]
  %v12899 = vld [vmem:[%s4430 + $0x16a] sm:$0xff]
  %v12900 = vld [vmem:[%s4430 + $0x172] sm:$0xff]
  %v12901 = vld [vmem:[%s4430 + $0x1b2] sm:$0xff]
  %v12902 = vld [vmem:[%s4430 + $0x1ba] sm:$0xff]
  %v12903 = vld [vmem:[%s4430 + $0x1ca] sm:$0xff]
  %v12904 = vld [vmem:[%s4430 + $0x1d2] sm:$0xff]
  %v12905 = vld [vmem:[%s4430 + $0x1e2] sm:$0xff]
  %v12906 = vld [vmem:[%s4430 + $0x1ea] sm:$0xff]
  %v12907 = vld [vmem:[%s4430 + $0x1fa] sm:$0xff]
  %v12908 = vld [vmem:[%s4430 + $0x202] sm:$0xff]
  %v12909 = vld [vmem:[%s4430 + $0x212] sm:$0xff]
  %v12910 = vld [vmem:[%s4430 + $0x21a] sm:$0xff]
  %v12911 = vld [vmem:[%s4430 + $0x22a] sm:$0xff]
  %v12912 = vld [vmem:[%s4430 + $0x232] sm:$0xff]
  %v12913 = vld [vmem:[%s4430 + $0x242] sm:$0xff]
  %v12914 = vld [vmem:[%s4430 + $0x24a] sm:$0xff]
  %v12915 = vld [vmem:[%s4430 + $0x25a] sm:$0xff]
  %v12916 = vld [vmem:[%s4430 + $0x262] sm:$0xff]
  %v12917 = vld [vmem:[%s4430 + $0x272] sm:$0xff]
  %v12918 = vld [vmem:[%s4430 + $0x27a] sm:$0xff]
  %v12919 = vld [vmem:[%s4430 + $0x28a] sm:$0xff]
  %v12920 = vld [vmem:[%s4430 + $0x292] sm:$0xff]
  %v12921 = vld [vmem:[%s4430 + $0x2a2] sm:$0xff]
  %v12922 = vld [vmem:[%s4430 + $0x2aa] sm:$0xff]
  %v12923 = vld [vmem:[%s4430 + $0x2ba] sm:$0xff]
  %v12924 = vld [vmem:[%s4430 + $0x2c2] sm:$0xff]
  %v12925 = vld [vmem:[%s4430 + $0x2d2] sm:$0xff]
  %v12926 = vld [vmem:[%s4430 + $0x2da] sm:$0xff]
  %v12927 = vld [vmem:[%s4430 + $0x2ea] sm:$0xff]
  %v12928 = vld [vmem:[%s4430 + $0x2f2] sm:$0xff]
  %v12929 = vld [vmem:[%s4430 + $0x302] sm:$0xff]
  %v12930 = vld [vmem:[%s4430 + $0x30a] sm:$0xff]
  %v12931 = vld [vmem:[%s4430 + $0x31a] sm:$0xff]
  %v12932 = vld [vmem:[%s4430 + $0x322] sm:$0xff]
  %s12933 = scalar_lea.vmem %s2, 32
  %v12934 = vld [vmem:[%s12933] sm:$0xf]
  %v12936 = vsel %vm79, %v12869, 0
  %v12939 = vsel %vm79, %v12870, 0
  %v12942 = vsel %vm79, %v12871, 0
  %v12945 = vsel %vm79, %v12872, 0
  %v12948 = vsel %vm79, %v12873, 0
  %v12951 = vsel %vm79, %v12874, 0
  %v12954 = vsel %vm79, %v12875, 0
  %v12957 = vsel %vm79, %v12876, 0
  %v12960 = vsel %vm79, %v12877, 0
  %v12963 = vsel %vm79, %v12878, 0
  %v12966 = vsel %vm79, %v12879, 0
  %v12969 = vsel %vm79, %v12880, 0
  %v12972 = vsel %vm79, %v12881, 0
  %v12975 = vsel %vm79, %v12882, 0
  %v12978 = vsel %vm79, %v12883, 0
  %v12981 = vsel %vm79, %v12884, 0
  %v12984 = vsel %vm79, %v12885, 0
  %v12987 = vsel %vm79, %v12886, 0
  %v12990 = vsel %vm79, %v12887, 0
  %v12993 = vsel %vm79, %v12888, 0
  %v12996 = vsel %vm79, %v12889, 0
  %v12999 = vsel %vm79, %v12890, 0
  %v13002 = vsel %vm79, %v12891, 0
  %v13005 = vsel %vm79, %v12892, 0
  %v13008 = vsel %vm79, %v12893, 0
  %v13011 = vsel %vm79, %v12894, 0
  %v13014 = vsel %vm79, %v12895, 0
  %v13017 = vsel %vm79, %v12896, 0
  %v13020 = vsel %vm79, %v12897, 0
  %v13023 = vsel %vm79, %v12898, 0
  %v13026 = vsel %vm79, %v12899, 0
  %v13029 = vsel %vm79, %v12900, 0
  %v13032 = vsel %vm79, %v12901, 0
  %v13035 = vsel %vm79, %v12902, 0
  %v13038 = vsel %vm79, %v12903, 0
  %v13041 = vsel %vm79, %v12904, 0
  %v13044 = vsel %vm79, %v12905, 0
  %v13047 = vsel %vm79, %v12906, 0
  %v13050 = vsel %vm79, %v12907, 0
  %v13053 = vsel %vm79, %v12908, 0
  %v13056 = vsel %vm79, %v12909, 0
  %v13059 = vsel %vm79, %v12910, 0
  %v13062 = vsel %vm79, %v12911, 0
  %v13065 = vsel %vm79, %v12912, 0
  %v13068 = vsel %vm79, %v12913, 0
  %v13071 = vsel %vm79, %v12914, 0
  %v13074 = vsel %vm79, %v12915, 0
  %v13077 = vsel %vm79, %v12916, 0
  %v13080 = vsel %vm79, %v12917, 0
  %v13083 = vsel %vm79, %v12918, 0
  %v13086 = vsel %vm79, %v12919, 0
  %v13089 = vsel %vm79, %v12920, 0
  %v13092 = vsel %vm79, %v12921, 0
  %v13095 = vsel %vm79, %v12922, 0
  %v13098 = vsel %vm79, %v12923, 0
  %v13101 = vsel %vm79, %v12924, 0
  %v13104 = vsel %vm79, %v12925, 0
  %v13107 = vsel %vm79, %v12926, 0
  %v13110 = vsel %vm79, %v12927, 0
  %v13113 = vsel %vm79, %v12928, 0
  %v13116 = vsel %vm79, %v12929, 0
  %v13119 = vsel %vm79, %v12930, 0
  %v13122 = vsel %vm79, %v12931, 0
  %v13125 = vsel %vm79, %v12932, 0
  %v13128 = vsel %vm621, %v12934, 0
  %13130 = vmatprep.subr.mxu0 0.0
  %13131 = vmatpush1.msra.mxu0 0.0
  %13132 = vmatprep.subr.mxu0 0.0
  %13133 = vmatpush1.msra.mxu0 0.0
  %13134 = vmatprep.subr.mxu0 0.0
  %13135 = vmatpush1.msra.mxu0 0.0
  %13136 = vmatprep.subr.mxu0 0.0
  %13137 = vmatpush1.msra.mxu0 0.0
  %13138 = vmatprep.subr.mxu0 0.0
  %13139 = vmatpush1.msra.mxu0 0.0
  %13140 = vmatprep.subr.mxu0 0.0
  %13141 = vmatpush1.msra.mxu0 0.0
  %13142 = vmatprep.subr.mxu0 0.0
  %13143 = vmatpush1.msra.mxu0 0.0
  %13144 = vmatprep.subr.mxu0 0.0
  %13145 = vmatpush1.msra.mxu0 0.0
  %13146 = vmatprep.subr.mxu0 0.0
  %13147 = vmatpush1.msra.mxu0 0.0
  %13148 = vmatprep.subr.mxu0 0.0
  %13149 = vmatpush1.msra.mxu0 0.0
  %13150 = vmatprep.subr.mxu0 0.0
  %13151 = vmatpush1.msra.mxu0 0.0
  %13152 = vmatprep.subr.mxu0 0.0
  %13153 = vmatpush1.msra.mxu0 0.0
  %13154 = vmatprep.subr.mxu0 0.0
  %13155 = vmatpush1.msra.mxu0 0.0
  %13156 = vmatprep.subr.mxu0 0.0
  %13157 = vmatpush1.msra.mxu0 0.0
  %13158 = vmatprep.subr.mxu0 0.0
  %13159 = vmatpush1.msra.mxu0 0.0
  %13160 = vmatprep.subr.mxu0 0.0
  %13161 = vmatpush1.msra.mxu0 %v13128
  %13162 = vmatprep.subr.mxu0 0.0
  %13163 = vmatpush2.msra.mxu0 0.0
  %13164 = vmatprep.subr.mxu0 0.0
  %13165 = vmatpush2.msra.mxu0 0.0
  %13166 = vmatprep.subr.mxu0 0.0
  %13167 = vmatpush2.msra.mxu0 0.0
  %13168 = vmatprep.subr.mxu0 0.0
  %13169 = vmatpush2.msra.mxu0 0.0
  %13170 = vmatprep.subr.mxu0 0.0
  %13171 = vmatpush2.msra.mxu0 0.0
  %13172 = vmatprep.subr.mxu0 0.0
  %13173 = vmatpush2.msra.mxu0 0.0
  %13174 = vmatprep.subr.mxu0 0.0
  %13175 = vmatpush2.msra.mxu0 0.0
  %13176 = vmatprep.subr.mxu0 0.0
  %13177 = vmatpush2.msra.mxu0 0.0
  %13178 = vmatprep.subr.mxu0 0.0
  %13179 = vmatpush2.msra.mxu0 0.0
  %13180 = vmatprep.subr.mxu0 0.0
  %13181 = vmatpush2.msra.mxu0 0.0
  %13182 = vmatprep.subr.mxu0 0.0
  %13183 = vmatpush2.msra.mxu0 0.0
  %13184 = vmatprep.subr.mxu0 0.0
  %13185 = vmatpush2.msra.mxu0 0.0
  %13186 = vmatprep.subr.mxu0 0.0
  %13187 = vmatpush2.msra.mxu0 0.0
  %13188 = vmatprep.subr.mxu0 0.0
  %13189 = vmatpush2.msra.mxu0 0.0
  %13190 = vmatprep.subr.mxu0 0.0
  %13191 = vmatpush2.msra.mxu0 0.0
  %13192 = vmatprep.subr.mxu0 0.0
  %13193 = vmatpush2.msra.mxu0 0.0
  %13194 = vmatprep.mubr.f32.mxu0 0.0
  %13195 = vmatmul.mubr.f32.gmra.mxu0 %v12936
  %v13196 = vpop.f32.mrf.mxu0
  %v13197 = vadd.f32 0.0, %v13196
  %v13198 = vpop.f32.mrf.mxu0
  %13199 = vmatprep.mubr.f32.mxu0 0.0
  %13200 = vmatmul.mubr.f32.gmra.mxu0 %v12939
  %v13201 = vpop.f32.mrf.mxu0
  %v13202 = vadd.f32 0.0, %v13201
  %v13203 = vpop.f32.mrf.mxu0
  %13204 = vmatprep.mubr.f32.mxu0 0.0
  %13205 = vmatmul.mubr.f32.gmra.mxu0 %v12942
  %v13206 = vpop.f32.mrf.mxu0
  %v13207 = vadd.f32 0.0, %v13206
  %v13208 = vpop.f32.mrf.mxu0
  %13209 = vmatprep.mubr.f32.mxu0 0.0
  %13210 = vmatmul.mubr.f32.gmra.mxu0 %v12945
  %v13211 = vpop.f32.mrf.mxu0
  %v13212 = vadd.f32 0.0, %v13211
  %v13213 = vpop.f32.mrf.mxu0
  %13214 = vmatprep.mubr.f32.mxu0 0.0
  %13215 = vmatmul.mubr.f32.gmra.mxu0 %v12948
  %v13216 = vpop.f32.mrf.mxu0
  %v13217 = vadd.f32 0.0, %v13216
  %v13218 = vpop.f32.mrf.mxu0
  %13219 = vmatprep.mubr.f32.mxu0 0.0
  %13220 = vmatmul.mubr.f32.gmra.mxu0 %v12951
  %v13221 = vpop.f32.mrf.mxu0
  %v13222 = vadd.f32 0.0, %v13221
  %v13223 = vpop.f32.mrf.mxu0
  %13224 = vmatprep.mubr.f32.mxu0 0.0
  %13225 = vmatmul.mubr.f32.gmra.mxu0 %v12954
  %v13226 = vpop.f32.mrf.mxu0
  %v13227 = vadd.f32 0.0, %v13226
  %v13228 = vpop.f32.mrf.mxu0
  %13229 = vmatprep.mubr.f32.mxu0 0.0
  %13230 = vmatmul.mubr.f32.gmra.mxu0 %v12957
  %v13231 = vpop.f32.mrf.mxu0
  %v13232 = vadd.f32 0.0, %v13231
  %v13233 = vpop.f32.mrf.mxu0
  %13234 = vmatprep.mubr.f32.mxu0 0.0
  %13235 = vmatmul.mubr.f32.gmra.mxu0 %v12960
  %v13236 = vpop.f32.mrf.mxu0
  %v13237 = vadd.f32 0.0, %v13236
  %v13238 = vpop.f32.mrf.mxu0
  %13239 = vmatprep.mubr.f32.mxu0 0.0
  %13240 = vmatmul.mubr.f32.gmra.mxu0 %v12963
  %v13241 = vpop.f32.mrf.mxu0
  %v13242 = vadd.f32 0.0, %v13241
  %v13243 = vpop.f32.mrf.mxu0
  %13244 = vmatprep.mubr.f32.mxu0 0.0
  %13245 = vmatmul.mubr.f32.gmra.mxu0 %v12966
  %v13246 = vpop.f32.mrf.mxu0
  %v13247 = vadd.f32 0.0, %v13246
  %v13248 = vpop.f32.mrf.mxu0
  %13249 = vmatprep.mubr.f32.mxu0 0.0
  %13250 = vmatmul.mubr.f32.gmra.mxu0 %v12969
  %v13251 = vpop.f32.mrf.mxu0
  %v13252 = vadd.f32 0.0, %v13251
  %v13253 = vpop.f32.mrf.mxu0
  %13254 = vmatprep.mubr.f32.mxu0 0.0
  %13255 = vmatmul.mubr.f32.gmra.mxu0 %v12972
  %v13256 = vpop.f32.mrf.mxu0
  %v13257 = vadd.f32 0.0, %v13256
  %v13258 = vpop.f32.mrf.mxu0
  %13259 = vmatprep.mubr.f32.mxu0 0.0
  %13260 = vmatmul.mubr.f32.gmra.mxu0 %v12975
  %v13261 = vpop.f32.mrf.mxu0
  %v13262 = vadd.f32 0.0, %v13261
  %v13263 = vpop.f32.mrf.mxu0
  %13264 = vmatprep.mubr.f32.mxu0 0.0
  %13265 = vmatmul.mubr.f32.gmra.mxu0 %v12978
  %v13266 = vpop.f32.mrf.mxu0
  %v13267 = vadd.f32 0.0, %v13266
  %v13268 = vpop.f32.mrf.mxu0
  %13269 = vmatprep.mubr.f32.mxu0 0.0
  %13270 = vmatmul.mubr.f32.gmra.mxu0 %v12981
  %v13271 = vpop.f32.mrf.mxu0
  %v13272 = vadd.f32 0.0, %v13271
  %v13273 = vpop.f32.mrf.mxu0
  %13274 = vmatprep.mubr.f32.mxu0 0.0
  %13275 = vmatmul.mubr.f32.gmra.mxu0 %v12984
  %v13276 = vpop.f32.mrf.mxu0
  %v13277 = vadd.f32 0.0, %v13276
  %v13278 = vpop.f32.mrf.mxu0
  %13279 = vmatprep.mubr.f32.mxu0 0.0
  %13280 = vmatmul.mubr.f32.gmra.mxu0 %v12987
  %v13281 = vpop.f32.mrf.mxu0
  %v13282 = vadd.f32 0.0, %v13281
  %v13283 = vpop.f32.mrf.mxu0
  %13284 = vmatprep.mubr.f32.mxu0 0.0
  %13285 = vmatmul.mubr.f32.gmra.mxu0 %v12990
  %v13286 = vpop.f32.mrf.mxu0
  %v13287 = vadd.f32 0.0, %v13286
  %v13288 = vpop.f32.mrf.mxu0
  %13289 = vmatprep.mubr.f32.mxu0 0.0
  %13290 = vmatmul.mubr.f32.gmra.mxu0 %v12993
  %v13291 = vpop.f32.mrf.mxu0
  %v13292 = vadd.f32 0.0, %v13291
  %v13293 = vpop.f32.mrf.mxu0
  %13294 = vmatprep.mubr.f32.mxu0 0.0
  %13295 = vmatmul.mubr.f32.gmra.mxu0 %v12996
  %v13296 = vpop.f32.mrf.mxu0
  %v13297 = vadd.f32 0.0, %v13296
  %v13298 = vpop.f32.mrf.mxu0
  %13299 = vmatprep.mubr.f32.mxu0 0.0
  %13300 = vmatmul.mubr.f32.gmra.mxu0 %v12999
  %v13301 = vpop.f32.mrf.mxu0
  %v13302 = vadd.f32 0.0, %v13301
  %v13303 = vpop.f32.mrf.mxu0
  %13304 = vmatprep.mubr.f32.mxu0 0.0
  %13305 = vmatmul.mubr.f32.gmra.mxu0 %v13002
  %v13306 = vpop.f32.mrf.mxu0
  %v13307 = vadd.f32 0.0, %v13306
  %v13308 = vpop.f32.mrf.mxu0
  %13309 = vmatprep.mubr.f32.mxu0 0.0
  %13310 = vmatmul.mubr.f32.gmra.mxu0 %v13005
  %v13311 = vpop.f32.mrf.mxu0
  %v13312 = vadd.f32 0.0, %v13311
  %v13313 = vpop.f32.mrf.mxu0
  %13314 = vmatprep.mubr.f32.mxu0 0.0
  %13315 = vmatmul.mubr.f32.gmra.mxu0 %v13008
  %v13316 = vpop.f32.mrf.mxu0
  %v13317 = vadd.f32 0.0, %v13316
  %v13318 = vpop.f32.mrf.mxu0
  %13319 = vmatprep.mubr.f32.mxu0 0.0
  %13320 = vmatmul.mubr.f32.gmra.mxu0 %v13011
  %v13321 = vpop.f32.mrf.mxu0
  %v13322 = vadd.f32 0.0, %v13321
  %v13323 = vpop.f32.mrf.mxu0
  %13324 = vmatprep.mubr.f32.mxu0 0.0
  %13325 = vmatmul.mubr.f32.gmra.mxu0 %v13014
  %v13326 = vpop.f32.mrf.mxu0
  %v13327 = vadd.f32 0.0, %v13326
  %v13328 = vpop.f32.mrf.mxu0
  %13329 = vmatprep.mubr.f32.mxu0 0.0
  %13330 = vmatmul.mubr.f32.gmra.mxu0 %v13017
  %v13331 = vpop.f32.mrf.mxu0
  %v13332 = vadd.f32 0.0, %v13331
  %v13333 = vpop.f32.mrf.mxu0
  %13334 = vmatprep.mubr.f32.mxu0 0.0
  %13335 = vmatmul.mubr.f32.gmra.mxu0 %v13020
  %v13336 = vpop.f32.mrf.mxu0
  %v13337 = vadd.f32 0.0, %v13336
  %v13338 = vpop.f32.mrf.mxu0
  %13339 = vmatprep.mubr.f32.mxu0 0.0
  %13340 = vmatmul.mubr.f32.gmra.mxu0 %v13023
  %v13341 = vpop.f32.mrf.mxu0
  %v13342 = vadd.f32 0.0, %v13341
  %v13343 = vpop.f32.mrf.mxu0
  %13344 = vmatprep.mubr.f32.mxu0 0.0
  %13345 = vmatmul.mubr.f32.gmra.mxu0 %v13026
  %v13346 = vpop.f32.mrf.mxu0
  %v13347 = vadd.f32 0.0, %v13346
  %v13348 = vpop.f32.mrf.mxu0
  %13349 = vmatprep.mubr.f32.mxu0 0.0
  %13350 = vmatmul.mubr.f32.gmra.mxu0 %v13029
  %v13351 = vpop.f32.mrf.mxu0
  %v13352 = vadd.f32 0.0, %v13351
  %v13353 = vpop.f32.mrf.mxu0
  %13354 = vmatprep.mubr.f32.mxu0 0.0
  %13355 = vmatmul.mubr.f32.gmra.mxu0 %v13032
  %v13356 = vpop.f32.mrf.mxu0
  %v13357 = vadd.f32 0.0, %v13356
  %v13358 = vpop.f32.mrf.mxu0
  %13359 = vmatprep.mubr.f32.mxu0 0.0
  %13360 = vmatmul.mubr.f32.gmra.mxu0 %v13035
  %v13361 = vpop.f32.mrf.mxu0
  %v13362 = vadd.f32 0.0, %v13361
  %v13363 = vpop.f32.mrf.mxu0
  %13364 = vmatprep.mubr.f32.mxu0 0.0
  %13365 = vmatmul.mubr.f32.gmra.mxu0 %v13038
  %v13366 = vpop.f32.mrf.mxu0
  %v13367 = vadd.f32 0.0, %v13366
  %v13368 = vpop.f32.mrf.mxu0
  %13369 = vmatprep.mubr.f32.mxu0 0.0
  %13370 = vmatmul.mubr.f32.gmra.mxu0 %v13041
  %v13371 = vpop.f32.mrf.mxu0
  %v13372 = vadd.f32 0.0, %v13371
  %v13373 = vpop.f32.mrf.mxu0
  %13374 = vmatprep.mubr.f32.mxu0 0.0
  %13375 = vmatmul.mubr.f32.gmra.mxu0 %v13044
  %v13376 = vpop.f32.mrf.mxu0
  %v13377 = vadd.f32 0.0, %v13376
  %v13378 = vpop.f32.mrf.mxu0
  %13379 = vmatprep.mubr.f32.mxu0 0.0
  %13380 = vmatmul.mubr.f32.gmra.mxu0 %v13047
  %v13381 = vpop.f32.mrf.mxu0
  %v13382 = vadd.f32 0.0, %v13381
  %v13383 = vpop.f32.mrf.mxu0
  %13384 = vmatprep.mubr.f32.mxu0 0.0
  %13385 = vmatmul.mubr.f32.gmra.mxu0 %v13050
  %v13386 = vpop.f32.mrf.mxu0
  %v13387 = vadd.f32 0.0, %v13386
  %v13388 = vpop.f32.mrf.mxu0
  %13389 = vmatprep.mubr.f32.mxu0 0.0
  %13390 = vmatmul.mubr.f32.gmra.mxu0 %v13053
  %v13391 = vpop.f32.mrf.mxu0
  %v13392 = vadd.f32 0.0, %v13391
  %v13393 = vpop.f32.mrf.mxu0
  %13394 = vmatprep.mubr.f32.mxu0 0.0
  %13395 = vmatmul.mubr.f32.gmra.mxu0 %v13056
  %v13396 = vpop.f32.mrf.mxu0
  %v13397 = vadd.f32 0.0, %v13396
  %v13398 = vpop.f32.mrf.mxu0
  %13399 = vmatprep.mubr.f32.mxu0 0.0
  %13400 = vmatmul.mubr.f32.gmra.mxu0 %v13059
  %v13401 = vpop.f32.mrf.mxu0
  %v13402 = vadd.f32 0.0, %v13401
  %v13403 = vpop.f32.mrf.mxu0
  %13404 = vmatprep.mubr.f32.mxu0 0.0
  %13405 = vmatmul.mubr.f32.gmra.mxu0 %v13062
  %v13406 = vpop.f32.mrf.mxu0
  %v13407 = vadd.f32 0.0, %v13406
  %v13408 = vpop.f32.mrf.mxu0
  %13409 = vmatprep.mubr.f32.mxu0 0.0
  %13410 = vmatmul.mubr.f32.gmra.mxu0 %v13065
  %v13411 = vpop.f32.mrf.mxu0
  %v13412 = vadd.f32 0.0, %v13411
  %v13413 = vpop.f32.mrf.mxu0
  %13414 = vmatprep.mubr.f32.mxu0 0.0
  %13415 = vmatmul.mubr.f32.gmra.mxu0 %v13068
  %v13416 = vpop.f32.mrf.mxu0
  %v13417 = vadd.f32 0.0, %v13416
  %v13418 = vpop.f32.mrf.mxu0
  %13419 = vmatprep.mubr.f32.mxu0 0.0
  %13420 = vmatmul.mubr.f32.gmra.mxu0 %v13071
  %v13421 = vpop.f32.mrf.mxu0
  %v13422 = vadd.f32 0.0, %v13421
  %v13423 = vpop.f32.mrf.mxu0
  %13424 = vmatprep.mubr.f32.mxu0 0.0
  %13425 = vmatmul.mubr.f32.gmra.mxu0 %v13074
  %v13426 = vpop.f32.mrf.mxu0
  %v13427 = vadd.f32 0.0, %v13426
  %v13428 = vpop.f32.mrf.mxu0
  %13429 = vmatprep.mubr.f32.mxu0 0.0
  %13430 = vmatmul.mubr.f32.gmra.mxu0 %v13077
  %v13431 = vpop.f32.mrf.mxu0
  %v13432 = vadd.f32 0.0, %v13431
  %v13433 = vpop.f32.mrf.mxu0
  %13434 = vmatprep.mubr.f32.mxu0 0.0
  %13435 = vmatmul.mubr.f32.gmra.mxu0 %v13080
  %v13436 = vpop.f32.mrf.mxu0
  %v13437 = vadd.f32 0.0, %v13436
  %v13438 = vpop.f32.mrf.mxu0
  %13439 = vmatprep.mubr.f32.mxu0 0.0
  %13440 = vmatmul.mubr.f32.gmra.mxu0 %v13083
  %v13441 = vpop.f32.mrf.mxu0
  %v13442 = vadd.f32 0.0, %v13441
  %v13443 = vpop.f32.mrf.mxu0
  %13444 = vmatprep.mubr.f32.mxu0 0.0
  %13445 = vmatmul.mubr.f32.gmra.mxu0 %v13086
  %v13446 = vpop.f32.mrf.mxu0
  %v13447 = vadd.f32 0.0, %v13446
  %v13448 = vpop.f32.mrf.mxu0
  %13449 = vmatprep.mubr.f32.mxu0 0.0
  %13450 = vmatmul.mubr.f32.gmra.mxu0 %v13089
  %v13451 = vpop.f32.mrf.mxu0
  %v13452 = vadd.f32 0.0, %v13451
  %v13453 = vpop.f32.mrf.mxu0
  %13454 = vmatprep.mubr.f32.mxu0 0.0
  %13455 = vmatmul.mubr.f32.gmra.mxu0 %v13092
  %v13456 = vpop.f32.mrf.mxu0
  %v13457 = vadd.f32 0.0, %v13456
  %v13458 = vpop.f32.mrf.mxu0
  %13459 = vmatprep.mubr.f32.mxu0 0.0
  %13460 = vmatmul.mubr.f32.gmra.mxu0 %v13095
  %v13461 = vpop.f32.mrf.mxu0
  %v13462 = vadd.f32 0.0, %v13461
  %v13463 = vpop.f32.mrf.mxu0
  %13464 = vmatprep.mubr.f32.mxu0 0.0
  %13465 = vmatmul.mubr.f32.gmra.mxu0 %v13098
  %v13466 = vpop.f32.mrf.mxu0
  %v13467 = vadd.f32 0.0, %v13466
  %v13468 = vpop.f32.mrf.mxu0
  %13469 = vmatprep.mubr.f32.mxu0 0.0
  %13470 = vmatmul.mubr.f32.gmra.mxu0 %v13101
  %v13471 = vpop.f32.mrf.mxu0
  %v13472 = vadd.f32 0.0, %v13471
  %v13473 = vpop.f32.mrf.mxu0
  %13474 = vmatprep.mubr.f32.mxu0 0.0
  %13475 = vmatmul.mubr.f32.gmra.mxu0 %v13104
  %v13476 = vpop.f32.mrf.mxu0
  %v13477 = vadd.f32 0.0, %v13476
  %v13478 = vpop.f32.mrf.mxu0
  %13479 = vmatprep.mubr.f32.mxu0 0.0
  %13480 = vmatmul.mubr.f32.gmra.mxu0 %v13107
  %v13481 = vpop.f32.mrf.mxu0
  %v13482 = vadd.f32 0.0, %v13481
  %v13483 = vpop.f32.mrf.mxu0
  %13484 = vmatprep.mubr.f32.mxu0 0.0
  %13485 = vmatmul.mubr.f32.gmra.mxu0 %v13110
  %v13486 = vpop.f32.mrf.mxu0
  %v13487 = vadd.f32 0.0, %v13486
  %v13488 = vpop.f32.mrf.mxu0
  %13489 = vmatprep.mubr.f32.mxu0 0.0
  %13490 = vmatmul.mubr.f32.gmra.mxu0 %v13113
  %v13491 = vpop.f32.mrf.mxu0
  %v13492 = vadd.f32 0.0, %v13491
  %v13493 = vpop.f32.mrf.mxu0
  %13494 = vmatprep.mubr.f32.mxu0 0.0
  %13495 = vmatmul.mubr.f32.gmra.mxu0 %v13116
  %v13496 = vpop.f32.mrf.mxu0
  %v13497 = vadd.f32 0.0, %v13496
  %v13498 = vpop.f32.mrf.mxu0
  %13499 = vmatprep.mubr.f32.mxu0 0.0
  %13500 = vmatmul.mubr.f32.gmra.mxu0 %v13119
  %v13501 = vpop.f32.mrf.mxu0
  %v13502 = vadd.f32 0.0, %v13501
  %v13503 = vpop.f32.mrf.mxu0
  %13504 = vmatprep.mubr.f32.mxu0 0.0
  %13505 = vmatmul.mubr.f32.gmra.mxu0 %v13122
  %v13506 = vpop.f32.mrf.mxu0
  %v13507 = vadd.f32 0.0, %v13506
  %v13508 = vpop.f32.mrf.mxu0
  %13509 = vmatprep.mubr.f32.mxu0 0.0
  %13510 = vmatmul.mubr.f32.gmra.mxu0 %v13125
  %v13511 = vpop.f32.mrf.mxu0
  %v13512 = vadd.f32 0.0, %v13511
  %v13513 = vpop.f32.mrf.mxu0
  %13514 = vdwg.mxu0
  %v13515 = vadd.f32 %v12805, %v13197
  %v13516 = vadd.f32 %v12806, %v13202
  %v13517 = vadd.f32 %v12807, %v13207
  %v13518 = vadd.f32 %v12808, %v13212
  %v13519 = vadd.f32 %v12809, %v13217
  %v13520 = vadd.f32 %v12810, %v13222
  %v13521 = vadd.f32 %v12811, %v13227
  %v13522 = vadd.f32 %v12812, %v13232
  %v13523 = vadd.f32 %v12813, %v13237
  %v13524 = vadd.f32 %v12814, %v13242
  %v13525 = vadd.f32 %v12815, %v13247
  %v13526 = vadd.f32 %v12816, %v13252
  %v13527 = vadd.f32 %v12817, %v13257
  %v13528 = vadd.f32 %v12818, %v13262
  %v13529 = vadd.f32 %v12819, %v13267
  %v13530 = vadd.f32 %v12820, %v13272
  %v13531 = vadd.f32 %v12821, %v13277
  %v13532 = vadd.f32 %v12822, %v13282
  %v13533 = vadd.f32 %v12823, %v13287
  %v13534 = vadd.f32 %v12824, %v13292
  %v13535 = vadd.f32 %v12825, %v13297
  %v13536 = vadd.f32 %v12826, %v13302
  %v13537 = vadd.f32 %v12827, %v13307
  %v13538 = vadd.f32 %v12828, %v13312
  %v13539 = vadd.f32 %v12829, %v13317
  %v13540 = vadd.f32 %v12830, %v13322
  %v13541 = vadd.f32 %v12831, %v13327
  %v13542 = vadd.f32 %v12832, %v13332
  %v13543 = vadd.f32 %v12833, %v13337
  %v13544 = vadd.f32 %v12834, %v13342
  %v13545 = vadd.f32 %v12835, %v13347
  %v13546 = vadd.f32 %v12836, %v13352
  %v13547 = vadd.f32 %v12837, %v13357
  %v13548 = vadd.f32 %v12838, %v13362
  %v13549 = vadd.f32 %v12839, %v13367
  %v13550 = vadd.f32 %v12840, %v13372
  %v13551 = vadd.f32 %v12841, %v13377
  %v13552 = vadd.f32 %v12842, %v13382
  %v13553 = vadd.f32 %v12843, %v13387
  %v13554 = vadd.f32 %v12844, %v13392
  %v13555 = vadd.f32 %v12845, %v13397
  %v13556 = vadd.f32 %v12846, %v13402
  %v13557 = vadd.f32 %v12847, %v13407
  %v13558 = vadd.f32 %v12848, %v13412
  %v13559 = vadd.f32 %v12849, %v13417
  %v13560 = vadd.f32 %v12850, %v13422
  %v13561 = vadd.f32 %v12851, %v13427
  %v13562 = vadd.f32 %v12852, %v13432
  %v13563 = vadd.f32 %v12853, %v13437
  %v13564 = vadd.f32 %v12854, %v13442
  %v13565 = vadd.f32 %v12855, %v13447
  %v13566 = vadd.f32 %v12856, %v13452
  %v13567 = vadd.f32 %v12857, %v13457
  %v13568 = vadd.f32 %v12858, %v13462
  %v13569 = vadd.f32 %v12859, %v13467
  %v13570 = vadd.f32 %v12860, %v13472
  %v13571 = vadd.f32 %v12861, %v13477
  %v13572 = vadd.f32 %v12862, %v13482
  %v13573 = vadd.f32 %v12863, %v13487
  %v13574 = vadd.f32 %v12864, %v13492
  %v13575 = vadd.f32 %v12865, %v13497
  %v13576 = vadd.f32 %v12866, %v13502
  %v13577 = vadd.f32 %v12867, %v13507
  %v13578 = vadd.f32 %v12868, %v13512
  %v13579 = vsel %vm79, %v13515, 0.0
  %v13580 = vsel %vm79, %v13516, 0.0
  %v13581 = vadd.f32 %v13579, %v13580
  %v13582 = vsel %vm79, %v13517, 0.0
  %v13583 = vadd.f32 %v13581, %v13582
  %v13584 = vsel %vm79, %v13518, 0.0
  %v13585 = vadd.f32 %v13583, %v13584
  %v13586 = vsel %vm79, %v13519, 0.0
  %v13587 = vadd.f32 %v13585, %v13586
  %v13588 = vsel %vm79, %v13520, 0.0
  %v13589 = vadd.f32 %v13587, %v13588
  %v13590 = vsel %vm79, %v13521, 0.0
  %v13591 = vadd.f32 %v13589, %v13590
  %v13592 = vsel %vm79, %v13522, 0.0
  %v13593 = vadd.f32 %v13591, %v13592
  %v13594 = vsel %vm79, %v13523, 0.0
  %v13595 = vadd.f32 %v13593, %v13594
  %v13596 = vsel %vm79, %v13524, 0.0
  %v13597 = vadd.f32 %v13595, %v13596
  %v13598 = vsel %vm79, %v13525, 0.0
  %v13599 = vadd.f32 %v13597, %v13598
  %v13600 = vsel %vm79, %v13526, 0.0
  %v13601 = vadd.f32 %v13599, %v13600
  %v13602 = vsel %vm79, %v13527, 0.0
  %v13603 = vadd.f32 %v13601, %v13602
  %v13604 = vsel %vm79, %v13528, 0.0
  %v13605 = vadd.f32 %v13603, %v13604
  %v13606 = vsel %vm79, %v13529, 0.0
  %v13607 = vadd.f32 %v13605, %v13606
  %v13608 = vsel %vm79, %v13530, 0.0
  %v13609 = vadd.f32 %v13607, %v13608
  %v13610 = vsel %vm79, %v13531, 0.0
  %v13611 = vadd.f32 %v13609, %v13610
  %v13612 = vsel %vm79, %v13532, 0.0
  %v13613 = vadd.f32 %v13611, %v13612
  %v13614 = vsel %vm79, %v13533, 0.0
  %v13615 = vadd.f32 %v13613, %v13614
  %v13616 = vsel %vm79, %v13534, 0.0
  %v13617 = vadd.f32 %v13615, %v13616
  %v13618 = vsel %vm79, %v13535, 0.0
  %v13619 = vadd.f32 %v13617, %v13618
  %v13620 = vsel %vm79, %v13536, 0.0
  %v13621 = vadd.f32 %v13619, %v13620
  %v13622 = vsel %vm79, %v13537, 0.0
  %v13623 = vadd.f32 %v13621, %v13622
  %v13624 = vsel %vm79, %v13538, 0.0
  %v13625 = vadd.f32 %v13623, %v13624
  %v13626 = vsel %vm79, %v13539, 0.0
  %v13627 = vadd.f32 %v13625, %v13626
  %v13628 = vsel %vm79, %v13540, 0.0
  %v13629 = vadd.f32 %v13627, %v13628
  %v13630 = vsel %vm79, %v13541, 0.0
  %v13631 = vadd.f32 %v13629, %v13630
  %v13632 = vsel %vm79, %v13542, 0.0
  %v13633 = vadd.f32 %v13631, %v13632
  %v13634 = vsel %vm79, %v13543, 0.0
  %v13635 = vadd.f32 %v13633, %v13634
  %v13636 = vsel %vm79, %v13544, 0.0
  %v13637 = vadd.f32 %v13635, %v13636
  %v13638 = vsel %vm79, %v13545, 0.0
  %v13639 = vadd.f32 %v13637, %v13638
  %v13640 = vsel %vm79, %v13546, 0.0
  %v13641 = vadd.f32 %v13639, %v13640
  %v13642 = vrot.slane %v13641, 4
  %v13643 = vadd.f32 %v13641, %v13642
  %v13644 = vrot.slane %v13643, 2
  %v13645 = vadd.f32 %v13643, %v13644
  %v13646 = vrot.slane %v13645, 1
  %v13647 = vadd.f32 %v13645, %v13646
  %v13648 = vsel %vm79, %v13547, 0.0
  %v13649 = vsel %vm79, %v13548, 0.0
  %v13650 = vadd.f32 %v13648, %v13649
  %v13651 = vsel %vm79, %v13549, 0.0
  %v13652 = vadd.f32 %v13650, %v13651
  %v13653 = vsel %vm79, %v13550, 0.0
  %v13654 = vadd.f32 %v13652, %v13653
  %v13655 = vsel %vm79, %v13551, 0.0
  %v13656 = vadd.f32 %v13654, %v13655
  %v13657 = vsel %vm79, %v13552, 0.0
  %v13658 = vadd.f32 %v13656, %v13657
  %v13659 = vsel %vm79, %v13553, 0.0
  %v13660 = vadd.f32 %v13658, %v13659
  %v13661 = vsel %vm79, %v13554, 0.0
  %v13662 = vadd.f32 %v13660, %v13661
  %v13663 = vsel %vm79, %v13555, 0.0
  %v13664 = vadd.f32 %v13662, %v13663
  %v13665 = vsel %vm79, %v13556, 0.0
  %v13666 = vadd.f32 %v13664, %v13665
  %v13667 = vsel %vm79, %v13557, 0.0
  %v13668 = vadd.f32 %v13666, %v13667
  %v13669 = vsel %vm79, %v13558, 0.0
  %v13670 = vadd.f32 %v13668, %v13669
  %v13671 = vsel %vm79, %v13559, 0.0
  %v13672 = vadd.f32 %v13670, %v13671
  %v13673 = vsel %vm79, %v13560, 0.0
  %v13674 = vadd.f32 %v13672, %v13673
  %v13675 = vsel %vm79, %v13561, 0.0
  %v13676 = vadd.f32 %v13674, %v13675
  %v13677 = vsel %vm79, %v13562, 0.0
  %v13678 = vadd.f32 %v13676, %v13677
  %v13679 = vsel %vm79, %v13563, 0.0
  %v13680 = vadd.f32 %v13678, %v13679
  %v13681 = vsel %vm79, %v13564, 0.0
  %v13682 = vadd.f32 %v13680, %v13681
  %v13683 = vsel %vm79, %v13565, 0.0
  %v13684 = vadd.f32 %v13682, %v13683
  %v13685 = vsel %vm79, %v13566, 0.0
  %v13686 = vadd.f32 %v13684, %v13685
  %v13687 = vsel %vm79, %v13567, 0.0
  %v13688 = vadd.f32 %v13686, %v13687
  %v13689 = vsel %vm79, %v13568, 0.0
  %v13690 = vadd.f32 %v13688, %v13689
  %v13691 = vsel %vm79, %v13569, 0.0
  %v13692 = vadd.f32 %v13690, %v13691
  %v13693 = vsel %vm79, %v13570, 0.0
  %v13694 = vadd.f32 %v13692, %v13693
  %v13695 = vsel %vm79, %v13571, 0.0
  %v13696 = vadd.f32 %v13694, %v13695
  %v13697 = vsel %vm79, %v13572, 0.0
  %v13698 = vadd.f32 %v13696, %v13697
  %v13699 = vsel %vm79, %v13573, 0.0
  %v13700 = vadd.f32 %v13698, %v13699
  %v13701 = vsel %vm79, %v13574, 0.0
  %v13702 = vadd.f32 %v13700, %v13701
  %v13703 = vsel %vm79, %v13575, 0.0
  %v13704 = vadd.f32 %v13702, %v13703
  %v13705 = vsel %vm79, %v13576, 0.0
  %v13706 = vadd.f32 %v13704, %v13705
  %v13707 = vsel %vm79, %v13577, 0.0
  %v13708 = vadd.f32 %v13706, %v13707
  %v13709 = vsel %vm79, %v13578, 0.0
  %v13710 = vadd.f32 %v13708, %v13709
  %v13711 = vrot.slane %v13710, 4
  %v13712 = vadd.f32 %v13710, %v13711
  %v13713 = vrot.slane %v13712, 2
  %v13714 = vadd.f32 %v13712, %v13713
  %v13715 = vrot.slane %v13714, 1
  %v13716 = vadd.f32 %v13714, %v13715
  %v13717 = vmul.f32 %v13647, %v6699
  %v13718 = vmul.f32 %v13716, %v6699
  %v13719 = vsub.f32 %v13515, %v13717
  %v13720 = vsub.f32 %v13516, %v13717
  %v13721 = vsub.f32 %v13517, %v13717
  %v13722 = vsub.f32 %v13518, %v13717
  %v13723 = vsub.f32 %v13519, %v13717
  %v13724 = vsub.f32 %v13520, %v13717
  %v13725 = vsub.f32 %v13521, %v13717
  %v13726 = vsub.f32 %v13522, %v13717
  %v13727 = vsub.f32 %v13523, %v13717
  %v13728 = vsub.f32 %v13524, %v13717
  %v13729 = vsub.f32 %v13525, %v13717
  %v13730 = vsub.f32 %v13526, %v13717
  %v13731 = vsub.f32 %v13527, %v13717
  %v13732 = vsub.f32 %v13528, %v13717
  %v13733 = vsub.f32 %v13529, %v13717
  %v13734 = vsub.f32 %v13530, %v13717
  %v13735 = vsub.f32 %v13531, %v13717
  %v13736 = vsub.f32 %v13532, %v13717
  %v13737 = vsub.f32 %v13533, %v13717
  %v13738 = vsub.f32 %v13534, %v13717
  %v13739 = vsub.f32 %v13535, %v13717
  %v13740 = vsub.f32 %v13536, %v13717
  %v13741 = vsub.f32 %v13537, %v13717
  %v13742 = vsub.f32 %v13538, %v13717
  %v13743 = vsub.f32 %v13539, %v13717
  %v13744 = vsub.f32 %v13540, %v13717
  %v13745 = vsub.f32 %v13541, %v13717
  %v13746 = vsub.f32 %v13542, %v13717
  %v13747 = vsub.f32 %v13543, %v13717
  %v13748 = vsub.f32 %v13544, %v13717
  %v13749 = vsub.f32 %v13545, %v13717
  %v13750 = vsub.f32 %v13546, %v13717
  %v13751 = vsub.f32 %v13547, %v13718
  %v13752 = vsub.f32 %v13548, %v13718
  %v13753 = vsub.f32 %v13549, %v13718
  %v13754 = vsub.f32 %v13550, %v13718
  %v13755 = vsub.f32 %v13551, %v13718
  %v13756 = vsub.f32 %v13552, %v13718
  %v13757 = vsub.f32 %v13553, %v13718
  %v13758 = vsub.f32 %v13554, %v13718
  %v13759 = vsub.f32 %v13555, %v13718
  %v13760 = vsub.f32 %v13556, %v13718
  %v13761 = vsub.f32 %v13557, %v13718
  %v13762 = vsub.f32 %v13558, %v13718
  %v13763 = vsub.f32 %v13559, %v13718
  %v13764 = vsub.f32 %v13560, %v13718
  %v13765 = vsub.f32 %v13561, %v13718
  %v13766 = vsub.f32 %v13562, %v13718
  %v13767 = vsub.f32 %v13563, %v13718
  %v13768 = vsub.f32 %v13564, %v13718
  %v13769 = vsub.f32 %v13565, %v13718
  %v13770 = vsub.f32 %v13566, %v13718
  %v13771 = vsub.f32 %v13567, %v13718
  %v13772 = vsub.f32 %v13568, %v13718
  %v13773 = vsub.f32 %v13569, %v13718
  %v13774 = vsub.f32 %v13570, %v13718
  %v13775 = vsub.f32 %v13571, %v13718
  %v13776 = vsub.f32 %v13572, %v13718
  %v13777 = vsub.f32 %v13573, %v13718
  %v13778 = vsub.f32 %v13574, %v13718
  %v13779 = vsub.f32 %v13575, %v13718
  %v13780 = vsub.f32 %v13576, %v13718
  %v13781 = vsub.f32 %v13577, %v13718
  %v13782 = vsub.f32 %v13578, %v13718
  %v13783 = vmul.f32 %v13719, %v13719
  %v13784 = vmul.f32 %v13720, %v13720
  %v13785 = vmul.f32 %v13721, %v13721
  %v13786 = vmul.f32 %v13722, %v13722
  %v13787 = vmul.f32 %v13723, %v13723
  %v13788 = vmul.f32 %v13724, %v13724
  %v13789 = vmul.f32 %v13725, %v13725
  %v13790 = vmul.f32 %v13726, %v13726
  %v13791 = vmul.f32 %v13727, %v13727
  %v13792 = vmul.f32 %v13728, %v13728
  %v13793 = vmul.f32 %v13729, %v13729
  %v13794 = vmul.f32 %v13730, %v13730
  %v13795 = vmul.f32 %v13731, %v13731
  %v13796 = vmul.f32 %v13732, %v13732
  %v13797 = vmul.f32 %v13733, %v13733
  %v13798 = vmul.f32 %v13734, %v13734
  %v13799 = vmul.f32 %v13735, %v13735
  %v13800 = vmul.f32 %v13736, %v13736
  %v13801 = vmul.f32 %v13737, %v13737
  %v13802 = vmul.f32 %v13738, %v13738
  %v13803 = vmul.f32 %v13739, %v13739
  %v13804 = vmul.f32 %v13740, %v13740
  %v13805 = vmul.f32 %v13741, %v13741
  %v13806 = vmul.f32 %v13742, %v13742
  %v13807 = vmul.f32 %v13743, %v13743
  %v13808 = vmul.f32 %v13744, %v13744
  %v13809 = vmul.f32 %v13745, %v13745
  %v13810 = vmul.f32 %v13746, %v13746
  %v13811 = vmul.f32 %v13747, %v13747
  %v13812 = vmul.f32 %v13748, %v13748
  %v13813 = vmul.f32 %v13749, %v13749
  %v13814 = vmul.f32 %v13750, %v13750
  %v13815 = vmul.f32 %v13751, %v13751
  %v13816 = vmul.f32 %v13752, %v13752
  %v13817 = vmul.f32 %v13753, %v13753
  %v13818 = vmul.f32 %v13754, %v13754
  %v13819 = vmul.f32 %v13755, %v13755
  %v13820 = vmul.f32 %v13756, %v13756
  %v13821 = vmul.f32 %v13757, %v13757
  %v13822 = vmul.f32 %v13758, %v13758
  %v13823 = vmul.f32 %v13759, %v13759
  %v13824 = vmul.f32 %v13760, %v13760
  %v13825 = vmul.f32 %v13761, %v13761
  %v13826 = vmul.f32 %v13762, %v13762
  %v13827 = vmul.f32 %v13763, %v13763
  %v13828 = vmul.f32 %v13764, %v13764
  %v13829 = vmul.f32 %v13765, %v13765
  %v13830 = vmul.f32 %v13766, %v13766
  %v13831 = vmul.f32 %v13767, %v13767
  %v13832 = vmul.f32 %v13768, %v13768
  %v13833 = vmul.f32 %v13769, %v13769
  %v13834 = vmul.f32 %v13770, %v13770
  %v13835 = vmul.f32 %v13771, %v13771
  %v13836 = vmul.f32 %v13772, %v13772
  %v13837 = vmul.f32 %v13773, %v13773
  %v13838 = vmul.f32 %v13774, %v13774
  %v13839 = vmul.f32 %v13775, %v13775
  %v13840 = vmul.f32 %v13776, %v13776
  %v13841 = vmul.f32 %v13777, %v13777
  %v13842 = vmul.f32 %v13778, %v13778
  %v13843 = vmul.f32 %v13779, %v13779
  %v13844 = vmul.f32 %v13780, %v13780
  %v13845 = vmul.f32 %v13781, %v13781
  %v13846 = vmul.f32 %v13782, %v13782
  %v13847 = vsel %vm79, %v13783, 0.0
  %v13848 = vsel %vm79, %v13784, 0.0
  %v13849 = vadd.f32 %v13847, %v13848
  %v13850 = vsel %vm79, %v13785, 0.0
  %v13851 = vadd.f32 %v13849, %v13850
  %v13852 = vsel %vm79, %v13786, 0.0
  %v13853 = vadd.f32 %v13851, %v13852
  %v13854 = vsel %vm79, %v13787, 0.0
  %v13855 = vadd.f32 %v13853, %v13854
  %v13856 = vsel %vm79, %v13788, 0.0
  %v13857 = vadd.f32 %v13855, %v13856
  %v13858 = vsel %vm79, %v13789, 0.0
  %v13859 = vadd.f32 %v13857, %v13858
  %v13860 = vsel %vm79, %v13790, 0.0
  %v13861 = vadd.f32 %v13859, %v13860
  %v13862 = vsel %vm79, %v13791, 0.0
  %v13863 = vadd.f32 %v13861, %v13862
  %v13864 = vsel %vm79, %v13792, 0.0
  %v13865 = vadd.f32 %v13863, %v13864
  %v13866 = vsel %vm79, %v13793, 0.0
  %v13867 = vadd.f32 %v13865, %v13866
  %v13868 = vsel %vm79, %v13794, 0.0
  %v13869 = vadd.f32 %v13867, %v13868
  %v13870 = vsel %vm79, %v13795, 0.0
  %v13871 = vadd.f32 %v13869, %v13870
  %v13872 = vsel %vm79, %v13796, 0.0
  %v13873 = vadd.f32 %v13871, %v13872
  %v13874 = vsel %vm79, %v13797, 0.0
  %v13875 = vadd.f32 %v13873, %v13874
  %v13876 = vsel %vm79, %v13798, 0.0
  %v13877 = vadd.f32 %v13875, %v13876
  %v13878 = vsel %vm79, %v13799, 0.0
  %v13879 = vadd.f32 %v13877, %v13878
  %v13880 = vsel %vm79, %v13800, 0.0
  %v13881 = vadd.f32 %v13879, %v13880
  %v13882 = vsel %vm79, %v13801, 0.0
  %v13883 = vadd.f32 %v13881, %v13882
  %v13884 = vsel %vm79, %v13802, 0.0
  %v13885 = vadd.f32 %v13883, %v13884
  %v13886 = vsel %vm79, %v13803, 0.0
  %v13887 = vadd.f32 %v13885, %v13886
  %v13888 = vsel %vm79, %v13804, 0.0
  %v13889 = vadd.f32 %v13887, %v13888
  %v13890 = vsel %vm79, %v13805, 0.0
  %v13891 = vadd.f32 %v13889, %v13890
  %v13892 = vsel %vm79, %v13806, 0.0
  %v13893 = vadd.f32 %v13891, %v13892
  %v13894 = vsel %vm79, %v13807, 0.0
  %v13895 = vadd.f32 %v13893, %v13894
  %v13896 = vsel %vm79, %v13808, 0.0
  %v13897 = vadd.f32 %v13895, %v13896
  %v13898 = vsel %vm79, %v13809, 0.0
  %v13899 = vadd.f32 %v13897, %v13898
  %v13900 = vsel %vm79, %v13810, 0.0
  %v13901 = vadd.f32 %v13899, %v13900
  %v13902 = vsel %vm79, %v13811, 0.0
  %v13903 = vadd.f32 %v13901, %v13902
  %v13904 = vsel %vm79, %v13812, 0.0
  %v13905 = vadd.f32 %v13903, %v13904
  %v13906 = vsel %vm79, %v13813, 0.0
  %v13907 = vadd.f32 %v13905, %v13906
  %v13908 = vsel %vm79, %v13814, 0.0
  %v13909 = vadd.f32 %v13907, %v13908
  %v13910 = vrot.slane %v13909, 4
  %v13911 = vadd.f32 %v13909, %v13910
  %v13912 = vrot.slane %v13911, 2
  %v13913 = vadd.f32 %v13911, %v13912
  %v13914 = vrot.slane %v13913, 1
  %v13915 = vadd.f32 %v13913, %v13914
  %v13916 = vsel %vm79, %v13815, 0.0
  %v13917 = vsel %vm79, %v13816, 0.0
  %v13918 = vadd.f32 %v13916, %v13917
  %v13919 = vsel %vm79, %v13817, 0.0
  %v13920 = vadd.f32 %v13918, %v13919
  %v13921 = vsel %vm79, %v13818, 0.0
  %v13922 = vadd.f32 %v13920, %v13921
  %v13923 = vsel %vm79, %v13819, 0.0
  %v13924 = vadd.f32 %v13922, %v13923
  %v13925 = vsel %vm79, %v13820, 0.0
  %v13926 = vadd.f32 %v13924, %v13925
  %v13927 = vsel %vm79, %v13821, 0.0
  %v13928 = vadd.f32 %v13926, %v13927
  %v13929 = vsel %vm79, %v13822, 0.0
  %v13930 = vadd.f32 %v13928, %v13929
  %v13931 = vsel %vm79, %v13823, 0.0
  %v13932 = vadd.f32 %v13930, %v13931
  %v13933 = vsel %vm79, %v13824, 0.0
  %v13934 = vadd.f32 %v13932, %v13933
  %v13935 = vsel %vm79, %v13825, 0.0
  %v13936 = vadd.f32 %v13934, %v13935
  %v13937 = vsel %vm79, %v13826, 0.0
  %v13938 = vadd.f32 %v13936, %v13937
  %v13939 = vsel %vm79, %v13827, 0.0
  %v13940 = vadd.f32 %v13938, %v13939
  %v13941 = vsel %vm79, %v13828, 0.0
  %v13942 = vadd.f32 %v13940, %v13941
  %v13943 = vsel %vm79, %v13829, 0.0
  %v13944 = vadd.f32 %v13942, %v13943
  %v13945 = vsel %vm79, %v13830, 0.0
  %v13946 = vadd.f32 %v13944, %v13945
  %v13947 = vsel %vm79, %v13831, 0.0
  %v13948 = vadd.f32 %v13946, %v13947
  %v13949 = vsel %vm79, %v13832, 0.0
  %v13950 = vadd.f32 %v13948, %v13949
  %v13951 = vsel %vm79, %v13833, 0.0
  %v13952 = vadd.f32 %v13950, %v13951
  %v13953 = vsel %vm79, %v13834, 0.0
  %v13954 = vadd.f32 %v13952, %v13953
  %v13955 = vsel %vm79, %v13835, 0.0
  %v13956 = vadd.f32 %v13954, %v13955
  %v13957 = vsel %vm79, %v13836, 0.0
  %v13958 = vadd.f32 %v13956, %v13957
  %v13959 = vsel %vm79, %v13837, 0.0
  %v13960 = vadd.f32 %v13958, %v13959
  %v13961 = vsel %vm79, %v13838, 0.0
  %v13962 = vadd.f32 %v13960, %v13961
  %v13963 = vsel %vm79, %v13839, 0.0
  %v13964 = vadd.f32 %v13962, %v13963
  %v13965 = vsel %vm79, %v13840, 0.0
  %v13966 = vadd.f32 %v13964, %v13965
  %v13967 = vsel %vm79, %v13841, 0.0
  %v13968 = vadd.f32 %v13966, %v13967
  %v13969 = vsel %vm79, %v13842, 0.0
  %v13970 = vadd.f32 %v13968, %v13969
  %v13971 = vsel %vm79, %v13843, 0.0
  %v13972 = vadd.f32 %v13970, %v13971
  %v13973 = vsel %vm79, %v13844, 0.0
  %v13974 = vadd.f32 %v13972, %v13973
  %v13975 = vsel %vm79, %v13845, 0.0
  %v13976 = vadd.f32 %v13974, %v13975
  %v13977 = vsel %vm79, %v13846, 0.0
  %v13978 = vadd.f32 %v13976, %v13977
  %v13979 = vrot.slane %v13978, 4
  %v13980 = vadd.f32 %v13978, %v13979
  %v13981 = vrot.slane %v13980, 2
  %v13982 = vadd.f32 %v13980, %v13981
  %v13983 = vrot.slane %v13982, 1
  %v13984 = vadd.f32 %v13982, %v13983
  %v13985 = vmul.f32 %v13915, %v6699
  %v13986 = vmul.f32 %v13984, %v6699
  %v13987 = vadd.f32 %v13985, 1e-05
  %v13988 = vadd.f32 %v13986, 1e-05
  %v13989 = vrsqrt.pop %v13987
  %v13990 = vrsqrt.pop %v13988
  %v13991 = vmul.f32 %v13719, %v13989
  %v13992 = vmul.f32 %v13720, %v13989
  %v13993 = vmul.f32 %v13721, %v13989
  %v13994 = vmul.f32 %v13722, %v13989
  %v13995 = vmul.f32 %v13723, %v13989
  %v13996 = vmul.f32 %v13724, %v13989
  %v13997 = vmul.f32 %v13725, %v13989
  %v13998 = vmul.f32 %v13726, %v13989
  %v13999 = vmul.f32 %v13727, %v13989
  %v14000 = vmul.f32 %v13728, %v13989
  %v14001 = vmul.f32 %v13729, %v13989
  %v14002 = vmul.f32 %v13730, %v13989
  %v14003 = vmul.f32 %v13731, %v13989
  %v14004 = vmul.f32 %v13732, %v13989
  %v14005 = vmul.f32 %v13733, %v13989
  %v14006 = vmul.f32 %v13734, %v13989
  %v14007 = vmul.f32 %v13735, %v13989
  %v14008 = vmul.f32 %v13736, %v13989
  %v14009 = vmul.f32 %v13737, %v13989
  %v14010 = vmul.f32 %v13738, %v13989
  %v14011 = vmul.f32 %v13739, %v13989
  %v14012 = vmul.f32 %v13740, %v13989
  %v14013 = vmul.f32 %v13741, %v13989
  %v14014 = vmul.f32 %v13742, %v13989
  %v14015 = vmul.f32 %v13743, %v13989
  %v14016 = vmul.f32 %v13744, %v13989
  %v14017 = vmul.f32 %v13745, %v13989
  %v14018 = vmul.f32 %v13746, %v13989
  %v14019 = vmul.f32 %v13747, %v13989
  %v14020 = vmul.f32 %v13748, %v13989
  %v14021 = vmul.f32 %v13749, %v13989
  %v14022 = vmul.f32 %v13750, %v13989
  %v14023 = vmul.f32 %v13751, %v13990
  %v14024 = vmul.f32 %v13752, %v13990
  %v14025 = vmul.f32 %v13753, %v13990
  %v14026 = vmul.f32 %v13754, %v13990
  %v14027 = vmul.f32 %v13755, %v13990
  %v14028 = vmul.f32 %v13756, %v13990
  %v14029 = vmul.f32 %v13757, %v13990
  %v14030 = vmul.f32 %v13758, %v13990
  %v14031 = vmul.f32 %v13759, %v13990
  %v14032 = vmul.f32 %v13760, %v13990
  %v14033 = vmul.f32 %v13761, %v13990
  %v14034 = vmul.f32 %v13762, %v13990
  %v14035 = vmul.f32 %v13763, %v13990
  %v14036 = vmul.f32 %v13764, %v13990
  %v14037 = vmul.f32 %v13765, %v13990
  %v14038 = vmul.f32 %v13766, %v13990
  %v14039 = vmul.f32 %v13767, %v13990
  %v14040 = vmul.f32 %v13768, %v13990
  %v14041 = vmul.f32 %v13769, %v13990
  %v14042 = vmul.f32 %v13770, %v13990
  %v14043 = vmul.f32 %v13771, %v13990
  %v14044 = vmul.f32 %v13772, %v13990
  %v14045 = vmul.f32 %v13773, %v13990
  %v14046 = vmul.f32 %v13774, %v13990
  %v14047 = vmul.f32 %v13775, %v13990
  %v14048 = vmul.f32 %v13776, %v13990
  %v14049 = vmul.f32 %v13777, %v13990
  %v14050 = vmul.f32 %v13778, %v13990
  %v14051 = vmul.f32 %v13779, %v13990
  %v14052 = vmul.f32 %v13780, %v13990
  %v14053 = vmul.f32 %v13781, %v13990
  %v14054 = vmul.f32 %v13782, %v13990
  %v14055 = vadd.f32 %v14, %v13991
  %v14056 = vadd.f32 %v15, %v13992
  %v14057 = vadd.f32 %v16, %v13993
  %v14058 = vadd.f32 %v17, %v13994
  %v14059 = vadd.f32 %v18, %v13995
  %v14060 = vadd.f32 %v19, %v13996
  %v14061 = vadd.f32 %v20, %v13997
  %v14062 = vadd.f32 %v21, %v13998
  %v14063 = vadd.f32 %v22, %v13999
  %v14064 = vadd.f32 %v23, %v14000
  %v14065 = vadd.f32 %v24, %v14001
  %v14066 = vadd.f32 %v25, %v14002
  %v14067 = vadd.f32 %v26, %v14003
  %v14068 = vadd.f32 %v27, %v14004
  %v14069 = vadd.f32 %v28, %v14005
  %v14070 = vadd.f32 %v29, %v14006
  %v14071 = vadd.f32 %v30, %v14007
  %v14072 = vadd.f32 %v31, %v14008
  %v14073 = vadd.f32 %v32, %v14009
  %v14074 = vadd.f32 %v33, %v14010
  %v14075 = vadd.f32 %v34, %v14011
  %v14076 = vadd.f32 %v35, %v14012
  %v14077 = vadd.f32 %v36, %v14013
  %v14078 = vadd.f32 %v37, %v14014
  %v14079 = vadd.f32 %v38, %v14015
  %v14080 = vadd.f32 %v39, %v14016
  %v14081 = vadd.f32 %v40, %v14017
  %v14082 = vadd.f32 %v41, %v14018
  %v14083 = vadd.f32 %v42, %v14019
  %v14084 = vadd.f32 %v43, %v14020
  %v14085 = vadd.f32 %v44, %v14021
  %v14086 = vadd.f32 %v45, %v14022
  %v14087 = vadd.f32 %v46, %v14023
  %v14088 = vadd.f32 %v47, %v14024
  %v14089 = vadd.f32 %v48, %v14025
  %v14090 = vadd.f32 %v49, %v14026
  %v14091 = vadd.f32 %v50, %v14027
  %v14092 = vadd.f32 %v51, %v14028
  %v14093 = vadd.f32 %v52, %v14029
  %v14094 = vadd.f32 %v53, %v14030
  %v14095 = vadd.f32 %v54, %v14031
  %v14096 = vadd.f32 %v55, %v14032
  %v14097 = vadd.f32 %v56, %v14033
  %v14098 = vadd.f32 %v57, %v14034
  %v14099 = vadd.f32 %v58, %v14035
  %v14100 = vadd.f32 %v59, %v14036
  %v14101 = vadd.f32 %v60, %v14037
  %v14102 = vadd.f32 %v61, %v14038
  %v14103 = vadd.f32 %v62, %v14039
  %v14104 = vadd.f32 %v63, %v14040
  %v14105 = vadd.f32 %v64, %v14041
  %v14106 = vadd.f32 %v65, %v14042
  %v14107 = vadd.f32 %v66, %v14043
  %v14108 = vadd.f32 %v67, %v14044
  %v14109 = vadd.f32 %v68, %v14045
  %v14110 = vadd.f32 %v69, %v14046
  %v14111 = vadd.f32 %v70, %v14047
  %v14112 = vadd.f32 %v71, %v14048
  %v14113 = vadd.f32 %v72, %v14049
  %v14114 = vadd.f32 %v73, %v14050
  %v14115 = vadd.f32 %v74, %v14051
  %v14116 = vadd.f32 %v75, %v14052
  %v14117 = vadd.f32 %v76, %v14053
  %v14118 = vadd.f32 %v77, %v14054
  %14119 = vst.msk [vmem:[%s3] sm:$0xff] %vm79, %v14055
  %14120 = vst.msk [vmem:[%s3 + $0x8] sm:$0xff] %vm79, %v14056
  %14121 = vst.msk [vmem:[%s3 + $0x10] sm:$0xff] %vm79, %v14057
  %14122 = vst.msk [vmem:[%s3 + $0x18] sm:$0xff] %vm79, %v14058
  %14123 = vst.msk [vmem:[%s3 + $0x20] sm:$0xff] %vm79, %v14059
  %14124 = vst.msk [vmem:[%s3 + $0x28] sm:$0xff] %vm79, %v14060
  %14125 = vst.msk [vmem:[%s3 + $0x30] sm:$0xff] %vm79, %v14061
  %14126 = vst.msk [vmem:[%s3 + $0x38] sm:$0xff] %vm79, %v14062
  %14127 = vst.msk [vmem:[%s3 + $0x40] sm:$0xff] %vm79, %v14063
  %14128 = vst.msk [vmem:[%s3 + $0x48] sm:$0xff] %vm79, %v14064
  %14129 = vst.msk [vmem:[%s3 + $0x50] sm:$0xff] %vm79, %v14065
  %14130 = vst.msk [vmem:[%s3 + $0x58] sm:$0xff] %vm79, %v14066
  %14131 = vst.msk [vmem:[%s3 + $0x60] sm:$0xff] %vm79, %v14067
  %14132 = vst.msk [vmem:[%s3 + $0x68] sm:$0xff] %vm79, %v14068
  %14133 = vst.msk [vmem:[%s3 + $0x70] sm:$0xff] %vm79, %v14069
  %14134 = vst.msk [vmem:[%s3 + $0x78] sm:$0xff] %vm79, %v14070
  %14135 = vst.msk [vmem:[%s3 + $0x80] sm:$0xff] %vm79, %v14071
  %14136 = vst.msk [vmem:[%s3 + $0x88] sm:$0xff] %vm79, %v14072
  %14137 = vst.msk [vmem:[%s3 + $0x90] sm:$0xff] %vm79, %v14073
  %14138 = vst.msk [vmem:[%s3 + $0x98] sm:$0xff] %vm79, %v14074
  %14139 = vst.msk [vmem:[%s3 + $0xa0] sm:$0xff] %vm79, %v14075
  %14140 = vst.msk [vmem:[%s3 + $0xa8] sm:$0xff] %vm79, %v14076
  %14141 = vst.msk [vmem:[%s3 + $0xb0] sm:$0xff] %vm79, %v14077
  %14142 = vst.msk [vmem:[%s3 + $0xb8] sm:$0xff] %vm79, %v14078
  %14143 = vst.msk [vmem:[%s3 + $0xc0] sm:$0xff] %vm79, %v14079
  %14144 = vst.msk [vmem:[%s3 + $0xc8] sm:$0xff] %vm79, %v14080
  %14145 = vst.msk [vmem:[%s3 + $0xd0] sm:$0xff] %vm79, %v14081
  %14146 = vst.msk [vmem:[%s3 + $0xd8] sm:$0xff] %vm79, %v14082
  %14147 = vst.msk [vmem:[%s3 + $0xe0] sm:$0xff] %vm79, %v14083
  %14148 = vst.msk [vmem:[%s3 + $0xe8] sm:$0xff] %vm79, %v14084
  %14149 = vst.msk [vmem:[%s3 + $0xf0] sm:$0xff] %vm79, %v14085
  %14150 = vst.msk [vmem:[%s3 + $0xf8] sm:$0xff] %vm79, %v14086
  %14151 = vst.msk [vmem:[%s3 + $0x100] sm:$0xff] %vm79, %v14087
  %14152 = vst.msk [vmem:[%s3 + $0x108] sm:$0xff] %vm79, %v14088
  %14153 = vst.msk [vmem:[%s3 + $0x110] sm:$0xff] %vm79, %v14089
  %14154 = vst.msk [vmem:[%s3 + $0x118] sm:$0xff] %vm79, %v14090
  %14155 = vst.msk [vmem:[%s3 + $0x120] sm:$0xff] %vm79, %v14091
  %14156 = vst.msk [vmem:[%s3 + $0x128] sm:$0xff] %vm79, %v14092
  %14157 = vst.msk [vmem:[%s3 + $0x130] sm:$0xff] %vm79, %v14093
  %14158 = vst.msk [vmem:[%s3 + $0x138] sm:$0xff] %vm79, %v14094
  %14159 = vst.msk [vmem:[%s3 + $0x140] sm:$0xff] %vm79, %v14095
  %14160 = vst.msk [vmem:[%s3 + $0x148] sm:$0xff] %vm79, %v14096
  %14161 = vst.msk [vmem:[%s3 + $0x150] sm:$0xff] %vm79, %v14097
  %14162 = vst.msk [vmem:[%s3 + $0x158] sm:$0xff] %vm79, %v14098
  %14163 = vst.msk [vmem:[%s3 + $0x160] sm:$0xff] %vm79, %v14099
  %14164 = vst.msk [vmem:[%s3 + $0x168] sm:$0xff] %vm79, %v14100
  %14165 = vst.msk [vmem:[%s3 + $0x170] sm:$0xff] %vm79, %v14101
  %14166 = vst.msk [vmem:[%s3 + $0x178] sm:$0xff] %vm79, %v14102
  %14167 = vst.msk [vmem:[%s3 + $0x180] sm:$0xff] %vm79, %v14103
  %14168 = vst.msk [vmem:[%s3 + $0x188] sm:$0xff] %vm79, %v14104
  %14169 = vst.msk [vmem:[%s3 + $0x190] sm:$0xff] %vm79, %v14105
  %14170 = vst.msk [vmem:[%s3 + $0x198] sm:$0xff] %vm79, %v14106
  %14171 = vst.msk [vmem:[%s3 + $0x1a0] sm:$0xff] %vm79, %v14107
  %14172 = vst.msk [vmem:[%s3 + $0x1a8] sm:$0xff] %vm79, %v14108
  %14173 = vst.msk [vmem:[%s3 + $0x1b0] sm:$0xff] %vm79, %v14109
  %14174 = vst.msk [vmem:[%s3 + $0x1b8] sm:$0xff] %vm79, %v14110
  %14175 = vst.msk [vmem:[%s3 + $0x1c0] sm:$0xff] %vm79, %v14111
  %14176 = vst.msk [vmem:[%s3 + $0x1c8] sm:$0xff] %vm79, %v14112
  %14177 = vst.msk [vmem:[%s3 + $0x1d0] sm:$0xff] %vm79, %v14113
  %14178 = vst.msk [vmem:[%s3 + $0x1d8] sm:$0xff] %vm79, %v14114
  %14179 = vst.msk [vmem:[%s3 + $0x1e0] sm:$0xff] %vm79, %v14115
  %14180 = vst.msk [vmem:[%s3 + $0x1e8] sm:$0xff] %vm79, %v14116
  %14181 = vst.msk [vmem:[%s3 + $0x1f0] sm:$0xff] %vm79, %v14117
  %14182 = vst.msk [vmem:[%s3 + $0x1f8] sm:$0xff] %vm79, %v14118
  // Predicated region
  $region14: #{tpu_custom_call.1} parent=0 // pred_check
    _
  $region15: #{tpu_custom_call.1} parent=0 // pred_check_branch
    %14184 = sbr.rel (0) target = $region17
  $region16: #{tpu_custom_call.1} parent=0 // pred_region
    _
  $region17: #{tpu_custom_call.1} parent=0 // pred_fallthru
    _
  // Predicated region
  $region18: #{tpu_custom_call.1} parent=0 // pred_check
    _
  $region19: #{tpu_custom_call.1} parent=0 // pred_check_branch
    %14186 = sbr.rel (0) target = $region21
  $region20: #{tpu_custom_call.1} parent=0 // pred_region
    _
  $region21: #{tpu_custom_call.1} parent=0 // pred_fallthru
    _

</llo_original>
